<compile_context>
chip_gen: v7x
topology: tpu7x:2x2x1
jax: 0.10.0
libtpu: 0.0.40
codegen_flags: <defaults>
</compile_context>

<pallas_src>
import jax
import jax.numpy as jnp
from jax import lax
from jax.experimental import pallas as pl
from jax.experimental.pallas import tpu as pltpu


_IMG = 28
_IN_F = _IMG * _IMG          # 784   (1x28x28, CHW-flat)
_H1_F = 16 * 5 * 5           # 400   (conv1 + maxpool output, CHW-flat)
_H2_F = 10 * 3 * 3           # 90
_CODE_F = 10
_D2_F = 8 * 15 * 15          # 1800
_OUT_F = 1 * _IMG * _IMG     # 784


def _round_up(a, b):
    return (a + b - 1) // b * b


# ---------------- one-time weight preprocessing (hoisted, plain JAX) ---------

def _conv_dense(w_oihw, stride, padding, h_in, w_in):
    """Exact dense matrix D such that flat_out = flat_in @ D for PyTorch Conv2d.

    flat_in / flat_out are CHW-flattened activations (NCHW without batch).
    """
    w_oihw = w_oihw.astype(jnp.float32)
    cout, cin, kh, kw = w_oihw.shape
    ho = (h_in + 2 * padding - kh) // stride + 1
    wo = (w_in + 2 * padding - kw) // stride + 1
    co, ci, dh, dw, oh, ow = jnp.meshgrid(
        jnp.arange(cout), jnp.arange(cin), jnp.arange(kh), jnp.arange(kw),
        jnp.arange(ho), jnp.arange(wo), indexing="ij")
    ih = oh * stride + dh - padding
    iw = ow * stride + dw - padding
    valid = (ih >= 0) & (ih < h_in) & (iw >= 0) & (iw < w_in)
    rows = (ci * (h_in * w_in)
            + jnp.clip(ih, 0, h_in - 1) * w_in + jnp.clip(iw, 0, w_in - 1))
    cols = co * (ho * wo) + oh * wo + ow
    vals = jnp.where(valid, w_oihw[co, ci, dh, dw], 0.0)
    D = jnp.zeros((cin * h_in * w_in, cout * ho * wo), jnp.float32)
    return D.at[rows.ravel(), cols.ravel()].add(vals.ravel()), ho, wo


def _convT_dense(w_iohw, stride, padding, h_in, w_in):
    """Exact dense matrix for PyTorch ConvTranspose2d (weight (Cin,Cout,k,k))."""
    w_iohw = w_iohw.astype(jnp.float32)
    cin, cout, kh, kw = w_iohw.shape
    ho = (h_in - 1) * stride - 2 * padding + kh
    wo = (w_in - 1) * stride - 2 * padding + kw
    ci, co, dh, dw, ih, iw = jnp.meshgrid(
        jnp.arange(cin), jnp.arange(cout), jnp.arange(kh), jnp.arange(kw),
        jnp.arange(h_in), jnp.arange(w_in), indexing="ij")
    oh = ih * stride + dh - padding
    ow = iw * stride + dw - padding
    valid = (oh >= 0) & (oh < ho) & (ow >= 0) & (ow < wo)
    rows = ci * (h_in * w_in) + ih * w_in + iw
    cols = (co * (ho * wo)
            + jnp.clip(oh, 0, ho - 1) * wo + jnp.clip(ow, 0, wo - 1))
    vals = jnp.where(valid, w_iohw[ci, co, dh, dw], 0.0)
    D = jnp.zeros((cin * h_in * w_in, cout * ho * wo), jnp.float32)
    return D.at[rows.ravel(), cols.ravel()].add(vals.ravel()), ho, wo


def prepare_params(params):
    """Pre-lower all convs to dense CHW-flat operators (bf16) + f32 row biases.

    Called once, outside the jitted forward (per review: hoist all weight
    reorders / reshapes off the per-call path).
    """
    wdt = jnp.bfloat16   # MXU-native matmul-operand dtype
    f32 = jnp.float32

    # Conv2d(1,16,3,stride=3,pad=1) on 28x28 -> (16,10,10); fold MaxPool2d(2,2)
    # by slicing the conv matrix at the four pooled sub-positions.
    d1, ho1, wo1 = _conv_dense(params["w1"], 3, 1, _IMG, _IMG)     # (784,1600)
    d1 = d1.reshape(_IN_F, 16, ho1, wo1)
    m1 = [d1[:, :, di::2, dj::2].reshape(_IN_F, _H1_F)
          for di in (0, 1) for dj in (0, 1)]
    # Conv2d(16,10,3,stride=2,pad=1) on 5x5 -> (10,3,3)
    d2, _, _ = _conv_dense(params["w2"], 2, 1, 5, 5)               # (400, 90)
    # Decoder transposed convs.
    dd1, _, _ = _convT_dense(params["wd1"], 2, 0, 1, 1)            # (10, 400)
    dd2, _, _ = _convT_dense(params["wd2"], 3, 1, 5, 5)            # (400,1800)
    dd3, _, _ = _convT_dense(params["wd3"], 2, 1, 15, 15)          # (1800,784)

    row = lambda b, rep: jnp.repeat(b.astype(f32), rep).reshape(1, -1)
    return {
        "m1a": m1[0].astype(wdt), "m1b": m1[1].astype(wdt),
        "m1c": m1[2].astype(wdt), "m1d": m1[3].astype(wdt),
        "b1": row(params["b1"], 25),
        "m2": d2.astype(wdt), "b2": row(params["b2"], 9),
        "w3": params["w3"].T.astype(wdt), "b3": row(params["b3"], 1),
        "md1": dd1.astype(wdt), "bd1": row(params["bd1"], 25),
        "md2": dd2.astype(wdt), "bd2": row(params["bd2"], 225),
        "md3": dd3.astype(wdt), "bd3": row(params["bd3"], _OUT_F),
    }


# ------------------------------ Pallas kernel --------------------------------

def _autoencoder_kernel(x_ref,
                        m1a_ref, m1b_ref, m1c_ref, m1d_ref, b1_ref,
                        m2_ref, b2_ref, w3_ref, b3_ref,
                        md1_ref, bd1_ref, md2_ref, bd2_ref, md3_ref, bd3_ref,
                        code_ref, out_ref):
    """Entire conv_autoencoder forward for one batch tile, VMEM-resident."""
    bf16 = jnp.bfloat16

    def mm(a, w_ref):  # bf16 x bf16 matmul, f32 accumulate (MXU)
        return jnp.dot(a, w_ref[...], preferred_element_type=jnp.float32)

    x = x_ref[...]                                             # (TN, 784) bf16

    # Conv2d(1,16,3,s3,p1) + ReLU + MaxPool2d(2,2): max over the four pooled
    # sub-position conv outputs (bias/relu commute with the max).
    y = jnp.maximum(jnp.maximum(mm(x, m1a_ref), mm(x, m1b_ref)),
                    jnp.maximum(mm(x, m1c_ref), mm(x, m1d_ref)))
    h1 = jnp.maximum(y + b1_ref[...], 0.0)                     # (TN, 400) f32

    # Conv2d(16,10,3,s2,p1) + ReLU
    h2 = jnp.maximum(mm(h1.astype(bf16), m2_ref) + b2_ref[...], 0.0)  # (TN,90)

    # Flatten (already CHW-flat) + Linear(90,10)
    code = mm(h2.astype(bf16), w3_ref) + b3_ref[...]           # (TN, 10) f32
    code_ref[...] = code.astype(code_ref.dtype)

    # ConvTranspose2d(10,16,5,s2,p0) on 1x1 + ReLU
    d1 = jnp.maximum(mm(code.astype(bf16), md1_ref) + bd1_ref[...], 0.0)
    # ConvTranspose2d(16,8,5,s3,p1) + ReLU
    d2 = jnp.maximum(mm(d1.astype(bf16), md2_ref) + bd2_ref[...], 0.0)
    # ConvTranspose2d(8,1,2,s2,p1) + Tanh
    d3 = jnp.tanh(mm(d2.astype(bf16), md3_ref) + bd3_ref[...])
    out_ref[...] = d3.astype(out_ref.dtype)


def forward(prep, x_nchw):
    """x: (N, 1, 28, 28) NCHW -> (code (N, 10), output (N, 1, 28, 28))."""
    N = x_nchw.shape[0]
    TN = min(256, _round_up(max(N, 1), 8))        # batch-row tile
    Npad = _round_up(N, TN)

    xf = x_nchw.reshape(N, _IN_F).astype(jnp.bfloat16)
    if Npad != N:
        xf = jnp.pad(xf, ((0, Npad - N), (0, 0)))

    weights = (prep["m1a"], prep["m1b"], prep["m1c"], prep["m1d"], prep["b1"],
               prep["m2"], prep["b2"], prep["w3"], prep["b3"],
               prep["md1"], prep["bd1"], prep["md2"], prep["bd2"],
               prep["md3"], prep["bd3"])

    def _resident(a):   # whole array, same block every grid step (stays in VMEM)
        return pl.BlockSpec(a.shape, lambda i: (0, 0))

    in_specs = [pl.BlockSpec((TN, _IN_F), lambda i: (i, 0))]
    in_specs += [_resident(a) for a in weights]
    out_specs = (pl.BlockSpec((TN, _CODE_F), lambda i: (i, 0)),
                 pl.BlockSpec((TN, _OUT_F), lambda i: (i, 0)))

    code_p, out_p = pl.pallas_call(
        _autoencoder_kernel,
        out_shape=(jax.ShapeDtypeStruct((Npad, _CODE_F), jnp.float32),
                   jax.ShapeDtypeStruct((Npad, _OUT_F), jnp.float32)),
        grid=(Npad // TN,),
        in_specs=in_specs,
        out_specs=out_specs,
        compiler_params=pltpu.CompilerParams(
            dimension_semantics=("parallel",),
            vmem_limit_bytes=48 * 1024 * 1024),
    )(xf, *weights)

    code = code_p[:N]
    output = out_p[:N].reshape(N, 1, _IMG, _IMG)
    return code, output


# --------------------------- deterministic params ----------------------------

def init_params(key):
    ks = jax.random.split(key, 12)

    def u(k, shape, fan_in):
        bound = 1.0 / jnp.sqrt(jnp.float32(fan_in))
        return jax.random.uniform(k, shape, jnp.float32, -bound, bound)

    return {
        # encoder
        "w1": u(ks[0], (16, 1, 3, 3), 1 * 9),
        "b1": u(ks[1], (16,), 1 * 9),
        "w2": u(ks[2], (10, 16, 3, 3), 16 * 9),
        "b2": u(ks[3], (10,), 16 * 9),
        "w3": u(ks[4], (10, 90), 90),
        "b3": u(ks[5], (10,), 90),
        # decoder (ConvTranspose2d weight layout: (Cin, Cout, k, k))
        "wd1": u(ks[6], (10, 16, 5, 5), 16 * 25),
        "bd1": u(ks[7], (16,), 16 * 25),
        "wd2": u(ks[8], (16, 8, 5, 5), 8 * 25),
        "bd2": u(ks[9], (8,), 8 * 25),
        "wd3": u(ks[10], (8, 1, 2, 2), 1 * 4),
        "bd3": u(ks[11], (1,), 1 * 4),
    }


# --------------------- plain-JAX reference (for validation) ------------------

def _ref_conv(x, w, b, stride, padding):
    y = lax.conv_general_dilated(x, w, (stride, stride),
                                 [(padding, padding)] * 2,
                                 dimension_numbers=("NCHW", "OIHW", "NCHW"))
    return y + b.reshape(1, -1, 1, 1)


def _ref_convT(x, w_iohw, b, stride, padding):
    k = w_iohw.shape[2]
    w_flip = jnp.transpose(jnp.flip(w_iohw, (2, 3)), (1, 0, 2, 3))   # -> OIHW
    y = lax.conv_general_dilated(x, w_flip, (1, 1),
                                 [(k - 1 - padding, k - 1 - padding)] * 2,
                                 lhs_dilation=(stride, stride),
                                 dimension_numbers=("NCHW", "OIHW", "NCHW"))
    return y + b.reshape(1, -1, 1, 1)


def reference_forward(params, x):
    h = jnp.maximum(_ref_conv(x, params["w1"], params["b1"], 3, 1), 0.0)
    h = lax.reduce_window(h, -jnp.inf, lax.max, (1, 1, 2, 2), (1, 1, 2, 2),
                          "VALID")
    h = jnp.maximum(_ref_conv(h, params["w2"], params["b2"], 2, 1), 0.0)
    flat = h.reshape(h.shape[0], -1)
    code = flat @ params["w3"].T + params["b3"]
    d = code.reshape(code.shape[0], 10, 1, 1)
    d = jnp.maximum(_ref_convT(d, params["wd1"], params["bd1"], 2, 0), 0.0)
    d = jnp.maximum(_ref_convT(d, params["wd2"], params["bd2"], 3, 1), 0.0)
    out = jnp.tanh(_ref_convT(d, params["wd3"], params["bd3"], 2, 1))
    return code, out


if __name__ == "__main__":
    key = jax.random.PRNGKey(0)
    pkey, xkey = jax.random.split(key)
    params = init_params(pkey)
    # MNIST-like input: the encoder's Linear(90, 10) forces 28x28 spatial.
    x = jax.random.normal(xkey, (2, 1, 28, 28), jnp.float32)

    prep = prepare_params(params)          # one-time weight prep, off hot path
    code, out = jax.jit(forward)(prep, x)
    jax.block_until_ready((code, out))

    assert code.shape == (2, 10), code.shape
    assert out.shape == (2, 1, 28, 28), out.shape
    assert code.dtype == jnp.float32 and out.dtype == jnp.float32

    # Validate against a plain-JAX/XLA reference.  Kernel uses bf16 matmul
    # operands (f32 accumulate), so use a loose tolerance per review.
    code_ref, out_ref = reference_forward(params, x)
    err = max(float(jnp.max(jnp.abs(code - code_ref))),
              float(jnp.max(jnp.abs(out - out_ref))))
    assert err < 5e-2, f"max abs error vs reference: {err}"

    print("KERNEL_OK")
</pallas_src>

<mosaic_0001>
module attributes {stable_mosaic.version = 11 : i64} {
  func.func @_autoencoder_kernel(%arg0: i32, %arg1: memref<8x784xbf16, #tpu.memory_space<vmem>>, %arg2: memref<784x400xbf16, #tpu.memory_space<vmem>>, %arg3: memref<784x400xbf16, #tpu.memory_space<vmem>>, %arg4: memref<784x400xbf16, #tpu.memory_space<vmem>>, %arg5: memref<784x400xbf16, #tpu.memory_space<vmem>>, %arg6: memref<1x400xf32, #tpu.memory_space<vmem>>, %arg7: memref<400x90xbf16, #tpu.memory_space<vmem>>, %arg8: memref<1x90xf32, #tpu.memory_space<vmem>>, %arg9: memref<90x10xbf16, #tpu.memory_space<vmem>>, %arg10: memref<1x10xf32, #tpu.memory_space<vmem>>, %arg11: memref<10x400xbf16, #tpu.memory_space<vmem>>, %arg12: memref<1x400xf32, #tpu.memory_space<vmem>>, %arg13: memref<400x1800xbf16, #tpu.memory_space<vmem>>, %arg14: memref<1x1800xf32, #tpu.memory_space<vmem>>, %arg15: memref<1800x784xbf16, #tpu.memory_space<vmem>>, %arg16: memref<1x784xf32, #tpu.memory_space<vmem>>, %arg17: memref<8x10xf32, #tpu.memory_space<vmem>>, %arg18: memref<8x784xf32, #tpu.memory_space<vmem>>) attributes {dimension_semantics = [#tpu.dimension_semantics<parallel>], iteration_bounds = array<i64: 1>, scalar_prefetch = 0 : i64, scratch_operands = 0 : i64, tpu.core_type = #tpu.core_type<tc>, window_params = [{transform_indices = @transform_0, window_bounds = array<i64: 8, 784>}, {pipeline_mode = #tpu.pipeline_mode<synchronous>, transform_indices = @transform_1, window_bounds = array<i64: 784, 400>}, {pipeline_mode = #tpu.pipeline_mode<synchronous>, transform_indices = @transform_2, window_bounds = array<i64: 784, 400>}, {pipeline_mode = #tpu.pipeline_mode<synchronous>, transform_indices = @transform_3, window_bounds = array<i64: 784, 400>}, {pipeline_mode = #tpu.pipeline_mode<synchronous>, transform_indices = @transform_4, window_bounds = array<i64: 784, 400>}, {pipeline_mode = #tpu.pipeline_mode<synchronous>, transform_indices = @transform_5, window_bounds = array<i64: 1, 400>}, {pipeline_mode = #tpu.pipeline_mode<synchronous>, transform_indices = @transform_6, window_bounds = array<i64: 400, 90>}, {pipeline_mode = #tpu.pipeline_mode<synchronous>, transform_indices = @transform_7, window_bounds = array<i64: 1, 90>}, {pipeline_mode = #tpu.pipeline_mode<synchronous>, transform_indices = @transform_8, window_bounds = array<i64: 90, 10>}, {pipeline_mode = #tpu.pipeline_mode<synchronous>, transform_indices = @transform_9, window_bounds = array<i64: 1, 10>}, {pipeline_mode = #tpu.pipeline_mode<synchronous>, transform_indices = @transform_10, window_bounds = array<i64: 10, 400>}, {pipeline_mode = #tpu.pipeline_mode<synchronous>, transform_indices = @transform_11, window_bounds = array<i64: 1, 400>}, {pipeline_mode = #tpu.pipeline_mode<synchronous>, transform_indices = @transform_12, window_bounds = array<i64: 400, 1800>}, {pipeline_mode = #tpu.pipeline_mode<synchronous>, transform_indices = @transform_13, window_bounds = array<i64: 1, 1800>}, {pipeline_mode = #tpu.pipeline_mode<synchronous>, transform_indices = @transform_14, window_bounds = array<i64: 1800, 784>}, {pipeline_mode = #tpu.pipeline_mode<synchronous>, transform_indices = @transform_15, window_bounds = array<i64: 1, 784>}, {transform_indices = @transform_16, window_bounds = array<i64: 8, 10>}, {transform_indices = @transform_17, window_bounds = array<i64: 8, 784>}]} {
    %c0 = arith.constant 0 : index
    %c0_0 = arith.constant 0 : index
    %0 = vector.load %arg1[%c0, %c0_0] : memref<8x784xbf16, #tpu.memory_space<vmem>>, vector<8x784xbf16>
    %c0_1 = arith.constant 0 : index
    %c0_2 = arith.constant 0 : index
    %1 = vector.load %arg2[%c0_1, %c0_2] : memref<784x400xbf16, #tpu.memory_space<vmem>>, vector<784x400xbf16>
    %cst = arith.constant dense<0.000000e+00> : vector<8x400xf32>
    %2 = tpu.matmul %0, %1, %cst {dimension_numbers = #tpu.dot_dimension_numbers<[1], [0], [0], [1], [0, 0, 1, 1], [], []>} : vector<8x784xbf16>, vector<784x400xbf16>, vector<8x400xf32> -> vector<8x400xf32>
    %c0_3 = arith.constant 0 : index
    %c0_4 = arith.constant 0 : index
    %3 = vector.load %arg3[%c0_3, %c0_4] : memref<784x400xbf16, #tpu.memory_space<vmem>>, vector<784x400xbf16>
    %cst_5 = arith.constant dense<0.000000e+00> : vector<8x400xf32>
    %4 = tpu.matmul %0, %3, %cst_5 {dimension_numbers = #tpu.dot_dimension_numbers<[1], [0], [0], [1], [0, 0, 1, 1], [], []>} : vector<8x784xbf16>, vector<784x400xbf16>, vector<8x400xf32> -> vector<8x400xf32>
    %5 = arith.maximumf %2, %4 : vector<8x400xf32>
    %c0_6 = arith.constant 0 : index
    %c0_7 = arith.constant 0 : index
    %6 = vector.load %arg4[%c0_6, %c0_7] : memref<784x400xbf16, #tpu.memory_space<vmem>>, vector<784x400xbf16>
    %cst_8 = arith.constant dense<0.000000e+00> : vector<8x400xf32>
    %7 = tpu.matmul %0, %6, %cst_8 {dimension_numbers = #tpu.dot_dimension_numbers<[1], [0], [0], [1], [0, 0, 1, 1], [], []>} : vector<8x784xbf16>, vector<784x400xbf16>, vector<8x400xf32> -> vector<8x400xf32>
    %c0_9 = arith.constant 0 : index
    %c0_10 = arith.constant 0 : index
    %8 = vector.load %arg5[%c0_9, %c0_10] : memref<784x400xbf16, #tpu.memory_space<vmem>>, vector<784x400xbf16>
    %cst_11 = arith.constant dense<0.000000e+00> : vector<8x400xf32>
    %9 = tpu.matmul %0, %8, %cst_11 {dimension_numbers = #tpu.dot_dimension_numbers<[1], [0], [0], [1], [0, 0, 1, 1], [], []>} : vector<8x784xbf16>, vector<784x400xbf16>, vector<8x400xf32> -> vector<8x400xf32>
    %10 = arith.maximumf %7, %9 : vector<8x400xf32>
    %11 = arith.maximumf %5, %10 : vector<8x400xf32>
    %c0_12 = arith.constant 0 : index
    %c0_13 = arith.constant 0 : index
    %12 = vector.load %arg6[%c0_12, %c0_13] : memref<1x400xf32, #tpu.memory_space<vmem>>, vector<1x400xf32>
    %13 = vector.broadcast %12 : vector<1x400xf32> to vector<8x400xf32>
    %14 = arith.addf %11, %13 : vector<8x400xf32>
    %cst_14 = arith.constant 0.000000e+00 : f32
    %15 = vector.broadcast %cst_14 : f32 to vector<8x400xf32>
    %16 = arith.maximumf %14, %15 : vector<8x400xf32>
    %17 = arith.truncf %16 : vector<8x400xf32> to vector<8x400xbf16>
    %c0_15 = arith.constant 0 : index
    %c0_16 = arith.constant 0 : index
    %18 = vector.load %arg7[%c0_15, %c0_16] : memref<400x90xbf16, #tpu.memory_space<vmem>>, vector<400x90xbf16>
    %cst_17 = arith.constant dense<0.000000e+00> : vector<8x90xf32>
    %19 = tpu.matmul %17, %18, %cst_17 {dimension_numbers = #tpu.dot_dimension_numbers<[1], [0], [0], [1], [0, 0, 1, 1], [], []>} : vector<8x400xbf16>, vector<400x90xbf16>, vector<8x90xf32> -> vector<8x90xf32>
    %c0_18 = arith.constant 0 : index
    %c0_19 = arith.constant 0 : index
    %20 = vector.load %arg8[%c0_18, %c0_19] : memref<1x90xf32, #tpu.memory_space<vmem>>, vector<1x90xf32>
    %21 = vector.broadcast %20 : vector<1x90xf32> to vector<8x90xf32>
    %22 = arith.addf %19, %21 : vector<8x90xf32>
    %cst_20 = arith.constant 0.000000e+00 : f32
    %23 = vector.broadcast %cst_20 : f32 to vector<8x90xf32>
    %24 = arith.maximumf %22, %23 : vector<8x90xf32>
    %25 = arith.truncf %24 : vector<8x90xf32> to vector<8x90xbf16>
    %c0_21 = arith.constant 0 : index
    %c0_22 = arith.constant 0 : index
    %26 = vector.load %arg9[%c0_21, %c0_22] : memref<90x10xbf16, #tpu.memory_space<vmem>>, vector<90x10xbf16>
    %cst_23 = arith.constant dense<0.000000e+00> : vector<8x10xf32>
    %27 = tpu.matmul %25, %26, %cst_23 {dimension_numbers = #tpu.dot_dimension_numbers<[1], [0], [0], [1], [0, 0, 1, 1], [], []>} : vector<8x90xbf16>, vector<90x10xbf16>, vector<8x10xf32> -> vector<8x10xf32>
    %c0_24 = arith.constant 0 : index
    %c0_25 = arith.constant 0 : index
    %28 = vector.load %arg10[%c0_24, %c0_25] : memref<1x10xf32, #tpu.memory_space<vmem>>, vector<1x10xf32>
    %29 = vector.broadcast %28 : vector<1x10xf32> to vector<8x10xf32>
    %30 = arith.addf %27, %29 : vector<8x10xf32>
    %c0_26 = arith.constant 0 : index
    %c0_27 = arith.constant 0 : index
    %31 = vector.load %arg17[%c0_26, %c0_27] : memref<8x10xf32, #tpu.memory_space<vmem>>, vector<8x10xf32>
    tpu.vector_store %arg17[%c0_26, %c0_27], %30 {strides = array<i32>} : memref<8x10xf32, #tpu.memory_space<vmem>>, vector<8x10xf32>,
    %32 = arith.truncf %30 : vector<8x10xf32> to vector<8x10xbf16>
    %c0_28 = arith.constant 0 : index
    %c0_29 = arith.constant 0 : index
    %33 = vector.load %arg11[%c0_28, %c0_29] : memref<10x400xbf16, #tpu.memory_space<vmem>>, vector<10x400xbf16>
    %cst_30 = arith.constant dense<0.000000e+00> : vector<8x400xf32>
    %34 = tpu.matmul %32, %33, %cst_30 {dimension_numbers = #tpu.dot_dimension_numbers<[1], [0], [0], [1], [0, 0, 1, 1], [], []>} : vector<8x10xbf16>, vector<10x400xbf16>, vector<8x400xf32> -> vector<8x400xf32>
    %c0_31 = arith.constant 0 : index
    %c0_32 = arith.constant 0 : index
    %35 = vector.load %arg12[%c0_31, %c0_32] : memref<1x400xf32, #tpu.memory_space<vmem>>, vector<1x400xf32>
    %36 = vector.broadcast %35 : vector<1x400xf32> to vector<8x400xf32>
    %37 = arith.addf %34, %36 : vector<8x400xf32>
    %cst_33 = arith.constant 0.000000e+00 : f32
    %38 = vector.broadcast %cst_33 : f32 to vector<8x400xf32>
    %39 = arith.maximumf %37, %38 : vector<8x400xf32>
    %40 = arith.truncf %39 : vector<8x400xf32> to vector<8x400xbf16>
    %c0_34 = arith.constant 0 : index
    %c0_35 = arith.constant 0 : index
    %41 = vector.load %arg13[%c0_34, %c0_35] : memref<400x1800xbf16, #tpu.memory_space<vmem>>, vector<400x1800xbf16>
    %cst_36 = arith.constant dense<0.000000e+00> : vector<8x1800xf32>
    %42 = tpu.matmul %40, %41, %cst_36 {dimension_numbers = #tpu.dot_dimension_numbers<[1], [0], [0], [1], [0, 0, 1, 1], [], []>} : vector<8x400xbf16>, vector<400x1800xbf16>, vector<8x1800xf32> -> vector<8x1800xf32>
    %c0_37 = arith.constant 0 : index
    %c0_38 = arith.constant 0 : index
    %43 = vector.load %arg14[%c0_37, %c0_38] : memref<1x1800xf32, #tpu.memory_space<vmem>>, vector<1x1800xf32>
    %44 = vector.broadcast %43 : vector<1x1800xf32> to vector<8x1800xf32>
    %45 = arith.addf %42, %44 : vector<8x1800xf32>
    %cst_39 = arith.constant 0.000000e+00 : f32
    %46 = vector.broadcast %cst_39 : f32 to vector<8x1800xf32>
    %47 = arith.maximumf %45, %46 : vector<8x1800xf32>
    %48 = arith.truncf %47 : vector<8x1800xf32> to vector<8x1800xbf16>
    %c0_40 = arith.constant 0 : index
    %c0_41 = arith.constant 0 : index
    %49 = vector.load %arg15[%c0_40, %c0_41] : memref<1800x784xbf16, #tpu.memory_space<vmem>>, vector<1800x784xbf16>
    %cst_42 = arith.constant dense<0.000000e+00> : vector<8x784xf32>
    %50 = tpu.matmul %48, %49, %cst_42 {dimension_numbers = #tpu.dot_dimension_numbers<[1], [0], [0], [1], [0, 0, 1, 1], [], []>} : vector<8x1800xbf16>, vector<1800x784xbf16>, vector<8x784xf32> -> vector<8x784xf32>
    %c0_43 = arith.constant 0 : index
    %c0_44 = arith.constant 0 : index
    %51 = vector.load %arg16[%c0_43, %c0_44] : memref<1x784xf32, #tpu.memory_space<vmem>>, vector<1x784xf32>
    %52 = vector.broadcast %51 : vector<1x784xf32> to vector<8x784xf32>
    %53 = arith.addf %50, %52 : vector<8x784xf32>
    %54 = math.tanh %53 : vector<8x784xf32>
    %c0_45 = arith.constant 0 : index
    %c0_46 = arith.constant 0 : index
    %55 = vector.load %arg18[%c0_45, %c0_46] : memref<8x784xf32, #tpu.memory_space<vmem>>, vector<8x784xf32>
    tpu.vector_store %arg18[%c0_45, %c0_46], %54 {strides = array<i32>} : memref<8x784xf32, #tpu.memory_space<vmem>>, vector<8x784xf32>,
    return
  }
  func.func @transform_0(%arg0: i32) -> (i32, i32) {
    %c0_i32 = arith.constant 0 : i32
    %c0_i32_0 = arith.constant 0 : i32
    return %arg0, %c0_i32 : i32, i32
  }
  func.func @transform_1(%arg0: i32) -> (i32, i32) {
    %c0_i32 = arith.constant 0 : i32
    %c0_i32_0 = arith.constant 0 : i32
    %c0_i32_1 = arith.constant 0 : i32
    return %c0_i32, %c0_i32_0 : i32, i32
  }
  func.func @transform_2(%arg0: i32) -> (i32, i32) {
    %c0_i32 = arith.constant 0 : i32
    %c0_i32_0 = arith.constant 0 : i32
    %c0_i32_1 = arith.constant 0 : i32
    return %c0_i32, %c0_i32_0 : i32, i32
  }
  func.func @transform_3(%arg0: i32) -> (i32, i32) {
    %c0_i32 = arith.constant 0 : i32
    %c0_i32_0 = arith.constant 0 : i32
    %c0_i32_1 = arith.constant 0 : i32
    return %c0_i32, %c0_i32_0 : i32, i32
  }
  func.func @transform_4(%arg0: i32) -> (i32, i32) {
    %c0_i32 = arith.constant 0 : i32
    %c0_i32_0 = arith.constant 0 : i32
    %c0_i32_1 = arith.constant 0 : i32
    return %c0_i32, %c0_i32_0 : i32, i32
  }
  func.func @transform_5(%arg0: i32) -> (i32, i32) {
    %c0_i32 = arith.constant 0 : i32
    %c0_i32_0 = arith.constant 0 : i32
    %c0_i32_1 = arith.constant 0 : i32
    return %c0_i32, %c0_i32_0 : i32, i32
  }
  func.func @transform_6(%arg0: i32) -> (i32, i32) {
    %c0_i32 = arith.constant 0 : i32
    %c0_i32_0 = arith.constant 0 : i32
    %c0_i32_1 = arith.constant 0 : i32
    return %c0_i32, %c0_i32_0 : i32, i32
  }
  func.func @transform_7(%arg0: i32) -> (i32, i32) {
    %c0_i32 = arith.constant 0 : i32
    %c0_i32_0 = arith.constant 0 : i32
    %c0_i32_1 = arith.constant 0 : i32
    return %c0_i32, %c0_i32_0 : i32, i32
  }
  func.func @transform_8(%arg0: i32) -> (i32, i32) {
    %c0_i32 = arith.constant 0 : i32
    %c0_i32_0 = arith.constant 0 : i32
    %c0_i32_1 = arith.constant 0 : i32
    return %c0_i32, %c0_i32_0 : i32, i32
  }
  func.func @transform_9(%arg0: i32) -> (i32, i32) {
    %c0_i32 = arith.constant 0 : i32
    %c0_i32_0 = arith.constant 0 : i32
    %c0_i32_1 = arith.constant 0 : i32
    return %c0_i32, %c0_i32_0 : i32, i32
  }
  func.func @transform_10(%arg0: i32) -> (i32, i32) {
    %c0_i32 = arith.constant 0 : i32
    %c0_i32_0 = arith.constant 0 : i32
    %c0_i32_1 = arith.constant 0 : i32
    return %c0_i32, %c0_i32_0 : i32, i32
  }
  func.func @transform_11(%arg0: i32) -> (i32, i32) {
    %c0_i32 = arith.constant 0 : i32
    %c0_i32_0 = arith.constant 0 : i32
    %c0_i32_1 = arith.constant 0 : i32
    return %c0_i32, %c0_i32_0 : i32, i32
  }
  func.func @transform_12(%arg0: i32) -> (i32, i32) {
    %c0_i32 = arith.constant 0 : i32
    %c0_i32_0 = arith.constant 0 : i32
    %c0_i32_1 = arith.constant 0 : i32
    return %c0_i32, %c0_i32_0 : i32, i32
  }
  func.func @transform_13(%arg0: i32) -> (i32, i32) {
    %c0_i32 = arith.constant 0 : i32
    %c0_i32_0 = arith.constant 0 : i32
    %c0_i32_1 = arith.constant 0 : i32
    return %c0_i32, %c0_i32_0 : i32, i32
  }
  func.func @transform_14(%arg0: i32) -> (i32, i32) {
    %c0_i32 = arith.constant 0 : i32
    %c0_i32_0 = arith.constant 0 : i32
    %c0_i32_1 = arith.constant 0 : i32
    return %c0_i32, %c0_i32_0 : i32, i32
  }
  func.func @transform_15(%arg0: i32) -> (i32, i32) {
    %c0_i32 = arith.constant 0 : i32
    %c0_i32_0 = arith.constant 0 : i32
    %c0_i32_1 = arith.constant 0 : i32
    return %c0_i32, %c0_i32_0 : i32, i32
  }
  func.func @transform_16(%arg0: i32) -> (i32, i32) {
    %c0_i32 = arith.constant 0 : i32
    %c0_i32_0 = arith.constant 0 : i32
    return %arg0, %c0_i32 : i32, i32
  }
  func.func @transform_17(%arg0: i32) -> (i32, i32) {
    %c0_i32 = arith.constant 0 : i32
    %c0_i32_0 = arith.constant 0 : i32
    return %arg0, %c0_i32 : i32, i32
  }
}

</mosaic_0001>

<llo_original>
// kernel: forward.1
$region0: #{forward.1}
  #allocation0 [shape = 'u32[]', space=smem, size = 0x4, offset = 0x4, fixed_abs, tag = 'smem constant byte address 0x4 - core index']
  #allocation1 [shape = 'u32[144,128]{1,0:T(1,128)}', space=vmem, size = 0x12000, scoped, tag = 'internal scratch']
  %s0 = inlined_call_operand.vmem [shape: bf16[8,784], index: 0, kind: input, shape index: {}]
  %s1 = inlined_call_operand.vmem [shape: bf16[784,400], index: 1, kind: input, shape index: {}]
  %s2 = inlined_call_operand.vmem [shape: bf16[784,400], index: 2, kind: input, shape index: {}]
  %s3 = inlined_call_operand.vmem [shape: bf16[784,400], index: 3, kind: input, shape index: {}]
  %s4 = inlined_call_operand.vmem [shape: bf16[784,400], index: 4, kind: input, shape index: {}]
  %s5 = inlined_call_operand.vmem [shape: f32[1,400], index: 5, kind: input, shape index: {}]
  %s6 = inlined_call_operand.vmem [shape: bf16[400,90], index: 6, kind: input, shape index: {}]
  %s7 = inlined_call_operand.vmem [shape: f32[1,90], index: 7, kind: input, shape index: {}]
  %s8 = inlined_call_operand.vmem [shape: bf16[90,10], index: 8, kind: input, shape index: {}]
  %s9 = inlined_call_operand.vmem [shape: f32[1,10], index: 9, kind: input, shape index: {}]
  %s10 = inlined_call_operand.vmem [shape: bf16[10,400], index: 10, kind: input, shape index: {}]
  %s11 = inlined_call_operand.vmem [shape: f32[1,400], index: 11, kind: input, shape index: {}]
  %s12 = inlined_call_operand.vmem [shape: bf16[400,1800], index: 12, kind: input, shape index: {}]
  %s13 = inlined_call_operand.vmem [shape: f32[1,1800], index: 13, kind: input, shape index: {}]
  %s14 = inlined_call_operand.vmem [shape: bf16[1800,784], index: 14, kind: input, shape index: {}]
  %s15 = inlined_call_operand.vmem [shape: f32[1,784], index: 15, kind: input, shape index: {}]
  %s16 = inlined_call_operand.vmem [shape: f32[8,10], index: 16, kind: output, shape index: {0}]
  %s17 = inlined_call_operand.vmem [shape: f32[8,784], index: 17, kind: output, shape index: {1}]
  %18 = xla_tuple %s16, %s17
  %s19 = sld [smem:[#allocation0]]
  $region82: #{forward.1} parent=0
    _
  %s21 = ssub.s32 1, %s19
  %s22 = scalar_select 0, %s21, %s19
  // Predicated region
  $region2: #{forward.1} parent=0 // pred_check
    _
  $region3: #{forward.1} parent=0 // pred_check_branch
    %24 = sbr.rel (0) target = $region5
  $region4: #{forward.1} parent=0 // pred_region
    _
  $region5: #{forward.1} parent=0 // pred_fallthru
    _
  // Predicated region
  $region6: #{forward.1} parent=0 // pred_check
    _
  $region7: #{forward.1} parent=0 // pred_check_branch
    %26 = sbr.rel (0) target = $region9
  $region8: #{forward.1} parent=0 // pred_region
    _
  $region9: #{forward.1} parent=0 // pred_fallthru
    _
  // Predicated region
  $region10: #{forward.1} parent=0 // pred_check
    _
  $region11: #{forward.1} parent=0 // pred_check_branch
    %28 = sbr.rel (0) target = $region13
  $region12: #{forward.1} parent=0 // pred_region
    _
  $region13: #{forward.1} parent=0 // pred_fallthru
    _
  // Predicated region
  $region14: #{forward.1} parent=0 // pred_check
    _
  $region15: #{forward.1} parent=0 // pred_check_branch
    %30 = sbr.rel (0) target = $region17
  $region16: #{forward.1} parent=0 // pred_region
    _
  $region17: #{forward.1} parent=0 // pred_fallthru
    _
  // Predicated region
  $region18: #{forward.1} parent=0 // pred_check
    _
  $region19: #{forward.1} parent=0 // pred_check_branch
    %32 = sbr.rel (0) target = $region21
  $region20: #{forward.1} parent=0 // pred_region
    _
  $region21: #{forward.1} parent=0 // pred_fallthru
    _
  // Predicated region
  $region22: #{forward.1} parent=0 // pred_check
    _
  $region23: #{forward.1} parent=0 // pred_check_branch
    %34 = sbr.rel (0) target = $region25
  $region24: #{forward.1} parent=0 // pred_region
    _
  $region25: #{forward.1} parent=0 // pred_fallthru
    _
  // Predicated region
  $region26: #{forward.1} parent=0 // pred_check
    _
  $region27: #{forward.1} parent=0 // pred_check_branch
    %36 = sbr.rel (0) target = $region29
  $region28: #{forward.1} parent=0 // pred_region
    _
  $region29: #{forward.1} parent=0 // pred_fallthru
    _
  // Predicated region
  $region30: #{forward.1} parent=0 // pred_check
    _
  $region31: #{forward.1} parent=0 // pred_check_branch
    %38 = sbr.rel (0) target = $region33
  $region32: #{forward.1} parent=0 // pred_region
    _
  $region33: #{forward.1} parent=0 // pred_fallthru
    _
  // Predicated region
  $region34: #{forward.1} parent=0 // pred_check
    _
  $region35: #{forward.1} parent=0 // pred_check_branch
    %40 = sbr.rel (0) target = $region37
  $region36: #{forward.1} parent=0 // pred_region
    _
  $region37: #{forward.1} parent=0 // pred_fallthru
    _
  // Predicated region
  $region38: #{forward.1} parent=0 // pred_check
    _
  $region39: #{forward.1} parent=0 // pred_check_branch
    %42 = sbr.rel (0) target = $region41
  $region40: #{forward.1} parent=0 // pred_region
    _
  $region41: #{forward.1} parent=0 // pred_fallthru
    _
  // Predicated region
  $region42: #{forward.1} parent=0 // pred_check
    _
  $region43: #{forward.1} parent=0 // pred_check_branch
    %44 = sbr.rel (0) target = $region45
  $region44: #{forward.1} parent=0 // pred_region
    _
  $region45: #{forward.1} parent=0 // pred_fallthru
    _
  // Predicated region
  $region46: #{forward.1} parent=0 // pred_check
    _
  $region47: #{forward.1} parent=0 // pred_check_branch
    %46 = sbr.rel (0) target = $region49
  $region48: #{forward.1} parent=0 // pred_region
    _
  $region49: #{forward.1} parent=0 // pred_fallthru
    _
  // Predicated region
  $region50: #{forward.1} parent=0 // pred_check
    _
  $region51: #{forward.1} parent=0 // pred_check_branch
    %48 = sbr.rel (0) target = $region53
  $region52: #{forward.1} parent=0 // pred_region
    _
  $region53: #{forward.1} parent=0 // pred_fallthru
    _
  // Predicated region
  $region54: #{forward.1} parent=0 // pred_check
    _
  $region55: #{forward.1} parent=0 // pred_check_branch
    %50 = sbr.rel (0) target = $region57
  $region56: #{forward.1} parent=0 // pred_region
    _
  $region57: #{forward.1} parent=0 // pred_fallthru
    _
  // Predicated region
  $region58: #{forward.1} parent=0 // pred_check
    _
  $region59: #{forward.1} parent=0 // pred_check_branch
    %52 = sbr.rel (0) target = $region61
  $region60: #{forward.1} parent=0 // pred_region
    _
  $region61: #{forward.1} parent=0 // pred_fallthru
    _
  // Predicated region
  $region62: #{forward.1} parent=0 // pred_check
    _
  $region63: #{forward.1} parent=0 // pred_check_branch
    %54 = sbr.rel (0) target = $region65
  $region64: #{forward.1} parent=0 // pred_region
    _
  $region65: #{forward.1} parent=0 // pred_fallthru
    _
  %v56 = vld [vmem:[%s0] sm:$0xff]
  %v57 = vld [vmem:[%s0 + $0x8] sm:$0xff]
  %v58 = vld [vmem:[%s0 + $0x10] sm:$0xff]
  %v59 = vld [vmem:[%s0 + $0x18] sm:$0xf]
  %v60 = vld [vmem:[%s1] sm:$0xff]
  %v61 = vld [vmem:[%s1 + $0x8] sm:$0xff]
  %v62 = vld [vmem:[%s1 + $0x10] sm:$0xff]
  %v63 = vld [vmem:[%s1 + $0x18] sm:$0xff]
  %v64 = vld [vmem:[%s1 + $0x20] sm:$0xff]
  %v65 = vld [vmem:[%s1 + $0x28] sm:$0xff]
  %v66 = vld [vmem:[%s1 + $0x30] sm:$0xff]
  %v67 = vld [vmem:[%s1 + $0x38] sm:$0xff]
  %v68 = vld [vmem:[%s1 + $0x40] sm:$0xff]
  %v69 = vld [vmem:[%s1 + $0x48] sm:$0xff]
  %v70 = vld [vmem:[%s1 + $0x50] sm:$0xff]
  %v71 = vld [vmem:[%s1 + $0x58] sm:$0xff]
  %v72 = vld [vmem:[%s1 + $0x60] sm:$0xff]
  %v73 = vld [vmem:[%s1 + $0x68] sm:$0xff]
  %v74 = vld [vmem:[%s1 + $0x70] sm:$0xff]
  %v75 = vld [vmem:[%s1 + $0x78] sm:$0xff]
  %v76 = vld [vmem:[%s1 + $0x80] sm:$0xff]
  %v77 = vld [vmem:[%s1 + $0x88] sm:$0xff]
  %v78 = vld [vmem:[%s1 + $0x90] sm:$0xff]
  %v79 = vld [vmem:[%s1 + $0x98] sm:$0xff]
  %v80 = vld [vmem:[%s1 + $0xa0] sm:$0xff]
  %v81 = vld [vmem:[%s1 + $0xa8] sm:$0xff]
  %v82 = vld [vmem:[%s1 + $0xb0] sm:$0xff]
  %v83 = vld [vmem:[%s1 + $0xb8] sm:$0xff]
  %v84 = vld [vmem:[%s1 + $0xc0] sm:$0xff]
  %v85 = vld [vmem:[%s1 + $0xc8] sm:$0xff]
  %v86 = vld [vmem:[%s1 + $0xd0] sm:$0xff]
  %v87 = vld [vmem:[%s1 + $0xd8] sm:$0xff]
  %v88 = vld [vmem:[%s1 + $0xe0] sm:$0xff]
  %v89 = vld [vmem:[%s1 + $0xe8] sm:$0xff]
  %v90 = vld [vmem:[%s1 + $0xf0] sm:$0xff]
  %v91 = vld [vmem:[%s1 + $0xf8] sm:$0xff]
  %v92 = vld [vmem:[%s1 + $0x100] sm:$0xff]
  %v93 = vld [vmem:[%s1 + $0x108] sm:$0xff]
  %v94 = vld [vmem:[%s1 + $0x110] sm:$0xff]
  %v95 = vld [vmem:[%s1 + $0x118] sm:$0xff]
  %v96 = vld [vmem:[%s1 + $0x120] sm:$0xff]
  %v97 = vld [vmem:[%s1 + $0x128] sm:$0xff]
  %v98 = vld [vmem:[%s1 + $0x130] sm:$0xff]
  %v99 = vld [vmem:[%s1 + $0x138] sm:$0xff]
  %v100 = vld [vmem:[%s1 + $0x140] sm:$0xff]
  %v101 = vld [vmem:[%s1 + $0x148] sm:$0xff]
  %v102 = vld [vmem:[%s1 + $0x150] sm:$0xff]
  %v103 = vld [vmem:[%s1 + $0x158] sm:$0xff]
  %v104 = vld [vmem:[%s1 + $0x160] sm:$0xff]
  %v105 = vld [vmem:[%s1 + $0x168] sm:$0xff]
  %v106 = vld [vmem:[%s1 + $0x170] sm:$0xff]
  %v107 = vld [vmem:[%s1 + $0x178] sm:$0xff]
  %v108 = vld [vmem:[%s1 + $0x180] sm:$0xff]
  %v109 = vld [vmem:[%s1 + $0x188] sm:$0xff]
  %v110 = vld [vmem:[%s1 + $0x190] sm:$0xff]
  %v111 = vld [vmem:[%s1 + $0x198] sm:$0xff]
  %v112 = vld [vmem:[%s1 + $0x1a0] sm:$0xff]
  %v113 = vld [vmem:[%s1 + $0x1a8] sm:$0xff]
  %v114 = vld [vmem:[%s1 + $0x1b0] sm:$0xff]
  %v115 = vld [vmem:[%s1 + $0x1b8] sm:$0xff]
  %v116 = vld [vmem:[%s1 + $0x1c0] sm:$0xff]
  %v117 = vld [vmem:[%s1 + $0x1c8] sm:$0xff]
  %v118 = vld [vmem:[%s1 + $0x1d0] sm:$0xff]
  %v119 = vld [vmem:[%s1 + $0x1d8] sm:$0xff]
  %v120 = vld [vmem:[%s1 + $0x1e0] sm:$0xff]
  %v121 = vld [vmem:[%s1 + $0x1e8] sm:$0xff]
  %v122 = vld [vmem:[%s1 + $0x1f0] sm:$0xff]
  %v123 = vld [vmem:[%s1 + $0x1f8] sm:$0xff]
  %v124 = vld [vmem:[%s1 + $0x200] sm:$0xff]
  %v125 = vld [vmem:[%s1 + $0x208] sm:$0xff]
  %v126 = vld [vmem:[%s1 + $0x210] sm:$0xff]
  %v127 = vld [vmem:[%s1 + $0x218] sm:$0xff]
  %v128 = vld [vmem:[%s1 + $0x220] sm:$0xff]
  %v129 = vld [vmem:[%s1 + $0x228] sm:$0xff]
  %v130 = vld [vmem:[%s1 + $0x230] sm:$0xff]
  %v131 = vld [vmem:[%s1 + $0x238] sm:$0xff]
  %v132 = vld [vmem:[%s1 + $0x240] sm:$0xff]
  %v133 = vld [vmem:[%s1 + $0x248] sm:$0xff]
  %v134 = vld [vmem:[%s1 + $0x250] sm:$0xff]
  %v135 = vld [vmem:[%s1 + $0x258] sm:$0xff]
  %v136 = vld [vmem:[%s1 + $0x260] sm:$0xff]
  %v137 = vld [vmem:[%s1 + $0x268] sm:$0xff]
  %v138 = vld [vmem:[%s1 + $0x270] sm:$0xff]
  %v139 = vld [vmem:[%s1 + $0x278] sm:$0xff]
  %v140 = vld [vmem:[%s1 + $0x280] sm:$0xff]
  %v141 = vld [vmem:[%s1 + $0x288] sm:$0xff]
  %v142 = vld [vmem:[%s1 + $0x290] sm:$0xff]
  %v143 = vld [vmem:[%s1 + $0x298] sm:$0xff]
  %v144 = vld [vmem:[%s1 + $0x2a0] sm:$0xff]
  %v145 = vld [vmem:[%s1 + $0x2a8] sm:$0xff]
  %v146 = vld [vmem:[%s1 + $0x2b0] sm:$0xff]
  %v147 = vld [vmem:[%s1 + $0x2b8] sm:$0xff]
  %v148 = vld [vmem:[%s1 + $0x2c0] sm:$0xff]
  %v149 = vld [vmem:[%s1 + $0x2c8] sm:$0xff]
  %v150 = vld [vmem:[%s1 + $0x2d0] sm:$0xff]
  %v151 = vld [vmem:[%s1 + $0x2d8] sm:$0xff]
  %v152 = vld [vmem:[%s1 + $0x2e0] sm:$0xff]
  %v153 = vld [vmem:[%s1 + $0x2e8] sm:$0xff]
  %v154 = vld [vmem:[%s1 + $0x2f0] sm:$0xff]
  %v155 = vld [vmem:[%s1 + $0x2f8] sm:$0xff]
  %v156 = vld [vmem:[%s1 + $0x300] sm:$0xff]
  %v157 = vld [vmem:[%s1 + $0x308] sm:$0xff]
  %v158 = vld [vmem:[%s1 + $0x310] sm:$0xff]
  %v159 = vld [vmem:[%s1 + $0x318] sm:$0xff]
  %v160 = vld [vmem:[%s1 + $0x320] sm:$0xff]
  %v161 = vld [vmem:[%s1 + $0x328] sm:$0xff]
  %v162 = vld [vmem:[%s1 + $0x330] sm:$0xff]
  %v163 = vld [vmem:[%s1 + $0x338] sm:$0xff]
  %v164 = vld [vmem:[%s1 + $0x340] sm:$0xff]
  %v165 = vld [vmem:[%s1 + $0x348] sm:$0xff]
  %v166 = vld [vmem:[%s1 + $0x350] sm:$0xff]
  %v167 = vld [vmem:[%s1 + $0x358] sm:$0xff]
  %v168 = vld [vmem:[%s1 + $0x360] sm:$0xff]
  %v169 = vld [vmem:[%s1 + $0x368] sm:$0xff]
  %v170 = vld [vmem:[%s1 + $0x370] sm:$0xff]
  %v171 = vld [vmem:[%s1 + $0x378] sm:$0xff]
  %v172 = vld [vmem:[%s1 + $0x380] sm:$0xff]
  %v173 = vld [vmem:[%s1 + $0x388] sm:$0xff]
  %v174 = vld [vmem:[%s1 + $0x390] sm:$0xff]
  %v175 = vld [vmem:[%s1 + $0x398] sm:$0xff]
  %v176 = vld [vmem:[%s1 + $0x3a0] sm:$0xff]
  %v177 = vld [vmem:[%s1 + $0x3a8] sm:$0xff]
  %v178 = vld [vmem:[%s1 + $0x3b0] sm:$0xff]
  %v179 = vld [vmem:[%s1 + $0x3b8] sm:$0xff]
  %v180 = vld [vmem:[%s1 + $0x3c0] sm:$0xff]
  %v181 = vld [vmem:[%s1 + $0x3c8] sm:$0xff]
  %v182 = vld [vmem:[%s1 + $0x3d0] sm:$0xff]
  %v183 = vld [vmem:[%s1 + $0x3d8] sm:$0xff]
  %v184 = vld [vmem:[%s1 + $0x3e0] sm:$0xff]
  %v185 = vld [vmem:[%s1 + $0x3e8] sm:$0xff]
  %v186 = vld [vmem:[%s1 + $0x3f0] sm:$0xff]
  %v187 = vld [vmem:[%s1 + $0x3f8] sm:$0xff]
  %v188 = vld [vmem:[%s1 + $0x400] sm:$0xff]
  %v189 = vld [vmem:[%s1 + $0x408] sm:$0xff]
  %v190 = vld [vmem:[%s1 + $0x410] sm:$0xff]
  %v191 = vld [vmem:[%s1 + $0x418] sm:$0xff]
  %v192 = vld [vmem:[%s1 + $0x420] sm:$0xff]
  %v193 = vld [vmem:[%s1 + $0x428] sm:$0xff]
  %v194 = vld [vmem:[%s1 + $0x430] sm:$0xff]
  %v195 = vld [vmem:[%s1 + $0x438] sm:$0xff]
  %v196 = vld [vmem:[%s1 + $0x440] sm:$0xff]
  %v197 = vld [vmem:[%s1 + $0x448] sm:$0xff]
  %v198 = vld [vmem:[%s1 + $0x450] sm:$0xff]
  %v199 = vld [vmem:[%s1 + $0x458] sm:$0xff]
  %v200 = vld [vmem:[%s1 + $0x460] sm:$0xff]
  %v201 = vld [vmem:[%s1 + $0x468] sm:$0xff]
  %v202 = vld [vmem:[%s1 + $0x470] sm:$0xff]
  %v203 = vld [vmem:[%s1 + $0x478] sm:$0xff]
  %v204 = vld [vmem:[%s1 + $0x480] sm:$0xff]
  %v205 = vld [vmem:[%s1 + $0x488] sm:$0xff]
  %v206 = vld [vmem:[%s1 + $0x490] sm:$0xff]
  %v207 = vld [vmem:[%s1 + $0x498] sm:$0xff]
  %v208 = vld [vmem:[%s1 + $0x4a0] sm:$0xff]
  %v209 = vld [vmem:[%s1 + $0x4a8] sm:$0xff]
  %v210 = vld [vmem:[%s1 + $0x4b0] sm:$0xff]
  %v211 = vld [vmem:[%s1 + $0x4b8] sm:$0xff]
  %v212 = vld [vmem:[%s1 + $0x4c0] sm:$0xff]
  %v213 = vld [vmem:[%s1 + $0x4c8] sm:$0xff]
  %v214 = vld [vmem:[%s1 + $0x4d0] sm:$0xff]
  %v215 = vld [vmem:[%s1 + $0x4d8] sm:$0xff]
  %v216 = vld [vmem:[%s1 + $0x4e0] sm:$0xff]
  %v217 = vld [vmem:[%s1 + $0x4e8] sm:$0xff]
  %v218 = vld [vmem:[%s1 + $0x4f0] sm:$0xff]
  %v219 = vld [vmem:[%s1 + $0x4f8] sm:$0xff]
  %v220 = vld [vmem:[%s1 + $0x500] sm:$0xff]
  %v221 = vld [vmem:[%s1 + $0x508] sm:$0xff]
  %v222 = vld [vmem:[%s1 + $0x510] sm:$0xff]
  %v223 = vld [vmem:[%s1 + $0x518] sm:$0xff]
  %v224 = vld [vmem:[%s1 + $0x520] sm:$0xff]
  %v225 = vld [vmem:[%s1 + $0x528] sm:$0xff]
  %v226 = vld [vmem:[%s1 + $0x530] sm:$0xff]
  %v227 = vld [vmem:[%s1 + $0x538] sm:$0xff]
  %v228 = vld [vmem:[%s1 + $0x540] sm:$0xff]
  %v229 = vld [vmem:[%s1 + $0x548] sm:$0xff]
  %v230 = vld [vmem:[%s1 + $0x550] sm:$0xff]
  %v231 = vld [vmem:[%s1 + $0x558] sm:$0xff]
  %v232 = vld [vmem:[%s1 + $0x560] sm:$0xff]
  %v233 = vld [vmem:[%s1 + $0x568] sm:$0xff]
  %v234 = vld [vmem:[%s1 + $0x570] sm:$0xff]
  %v235 = vld [vmem:[%s1 + $0x578] sm:$0xff]
  %v236 = vld [vmem:[%s1 + $0x580] sm:$0xff]
  %v237 = vld [vmem:[%s1 + $0x588] sm:$0xff]
  %v238 = vld [vmem:[%s1 + $0x590] sm:$0xff]
  %v239 = vld [vmem:[%s1 + $0x598] sm:$0xff]
  %v240 = vld [vmem:[%s1 + $0x5a0] sm:$0xff]
  %v241 = vld [vmem:[%s1 + $0x5a8] sm:$0xff]
  %v242 = vld [vmem:[%s1 + $0x5b0] sm:$0xff]
  %v243 = vld [vmem:[%s1 + $0x5b8] sm:$0xff]
  %v244 = vld [vmem:[%s1 + $0x5c0] sm:$0xff]
  %v245 = vld [vmem:[%s1 + $0x5c8] sm:$0xff]
  %v246 = vld [vmem:[%s1 + $0x5d0] sm:$0xff]
  %v247 = vld [vmem:[%s1 + $0x5d8] sm:$0xff]
  %v248 = vld [vmem:[%s1 + $0x5e0] sm:$0xff]
  %v249 = vld [vmem:[%s1 + $0x5e8] sm:$0xff]
  %v250 = vld [vmem:[%s1 + $0x5f0] sm:$0xff]
  %v251 = vld [vmem:[%s1 + $0x5f8] sm:$0xff]
  %v252 = vld [vmem:[%s1 + $0x600] sm:$0xff]
  %v253 = vld [vmem:[%s1 + $0x608] sm:$0xff]
  %v254 = vld [vmem:[%s1 + $0x610] sm:$0xff]
  %v255 = vld [vmem:[%s1 + $0x618] sm:$0xff]
  %v260 = vunpack.c.l.b16 %v56
  %v261 = vunpack.c.h.b16 %v56
  %v262 = vunpack.c.l.b16 %v57
  %v263 = vunpack.c.h.b16 %v57
  %v264 = vunpack.c.l.b16 %v58
  %v265 = vunpack.c.h.b16 %v58
  %v266 = vunpack.c.l.b16 %v59
  %v267 = vpack.c.b16 %v260, %v260
  %v268 = vpack.c.b16 %v261, %v261
  %v269 = vpack.c.b16 %v262, %v262
  %v270 = vpack.c.b16 %v263, %v263
  %v271 = vpack.c.b16 %v264, %v264
  %v272 = vpack.c.b16 %v265, %v265
  %v273 = vpack.c.b16 %v266, %v266
  %v476 = vunpack.c.l.b16 %v60
  %v477 = vunpack.c.h.b16 %v60
  %v478 = vunpack.c.l.b16 %v61
  %v479 = vunpack.c.h.b16 %v61
  %v480 = vunpack.c.l.b16 %v62
  %v481 = vunpack.c.h.b16 %v62
  %v482 = vunpack.c.l.b16 %v63
  %v483 = vunpack.c.h.b16 %v63
  %v484 = vunpack.c.l.b16 %v64
  %v485 = vunpack.c.h.b16 %v64
  %v486 = vunpack.c.l.b16 %v65
  %v487 = vunpack.c.h.b16 %v65
  %v488 = vunpack.c.l.b16 %v66
  %v489 = vunpack.c.h.b16 %v66
  %v490 = vunpack.c.l.b16 %v67
  %v491 = vunpack.c.h.b16 %v67
  %v492 = vunpack.c.l.b16 %v68
  %v493 = vunpack.c.h.b16 %v68
  %v494 = vunpack.c.l.b16 %v69
  %v495 = vunpack.c.h.b16 %v69
  %v496 = vunpack.c.l.b16 %v70
  %v497 = vunpack.c.h.b16 %v70
  %v498 = vunpack.c.l.b16 %v71
  %v499 = vunpack.c.h.b16 %v71
  %v500 = vunpack.c.l.b16 %v72
  %v501 = vunpack.c.h.b16 %v72
  %v502 = vunpack.c.l.b16 %v73
  %v503 = vunpack.c.h.b16 %v73
  %v504 = vunpack.c.l.b16 %v74
  %v505 = vunpack.c.h.b16 %v74
  %v506 = vunpack.c.l.b16 %v75
  %v507 = vunpack.c.h.b16 %v75
  %v508 = vunpack.c.l.b16 %v76
  %v509 = vunpack.c.h.b16 %v76
  %v510 = vunpack.c.l.b16 %v77
  %v511 = vunpack.c.h.b16 %v77
  %v512 = vunpack.c.l.b16 %v78
  %v513 = vunpack.c.h.b16 %v78
  %v514 = vunpack.c.l.b16 %v79
  %v515 = vunpack.c.h.b16 %v79
  %v516 = vunpack.c.l.b16 %v80
  %v517 = vunpack.c.h.b16 %v80
  %v518 = vunpack.c.l.b16 %v81
  %v519 = vunpack.c.h.b16 %v81
  %v520 = vunpack.c.l.b16 %v82
  %v521 = vunpack.c.h.b16 %v82
  %v522 = vunpack.c.l.b16 %v83
  %v523 = vunpack.c.h.b16 %v83
  %v524 = vunpack.c.l.b16 %v84
  %v525 = vunpack.c.h.b16 %v84
  %v526 = vunpack.c.l.b16 %v85
  %v527 = vunpack.c.h.b16 %v85
  %v528 = vunpack.c.l.b16 %v86
  %v529 = vunpack.c.h.b16 %v86
  %v530 = vunpack.c.l.b16 %v87
  %v531 = vunpack.c.h.b16 %v87
  %v532 = vunpack.c.l.b16 %v88
  %v533 = vunpack.c.h.b16 %v88
  %v534 = vunpack.c.l.b16 %v89
  %v535 = vunpack.c.h.b16 %v89
  %v536 = vunpack.c.l.b16 %v90
  %v537 = vunpack.c.h.b16 %v90
  %v538 = vunpack.c.l.b16 %v91
  %v539 = vunpack.c.h.b16 %v91
  %v540 = vunpack.c.l.b16 %v92
  %v541 = vunpack.c.h.b16 %v92
  %v542 = vunpack.c.l.b16 %v93
  %v543 = vunpack.c.h.b16 %v93
  %v544 = vunpack.c.l.b16 %v94
  %v545 = vunpack.c.h.b16 %v94
  %v546 = vunpack.c.l.b16 %v95
  %v547 = vunpack.c.h.b16 %v95
  %v548 = vunpack.c.l.b16 %v96
  %v549 = vunpack.c.h.b16 %v96
  %v550 = vunpack.c.l.b16 %v97
  %v551 = vunpack.c.h.b16 %v97
  %v552 = vunpack.c.l.b16 %v98
  %v553 = vunpack.c.h.b16 %v98
  %v554 = vunpack.c.l.b16 %v99
  %v555 = vunpack.c.h.b16 %v99
  %v556 = vunpack.c.l.b16 %v100
  %v557 = vunpack.c.h.b16 %v100
  %v558 = vunpack.c.l.b16 %v101
  %v559 = vunpack.c.h.b16 %v101
  %v560 = vunpack.c.l.b16 %v102
  %v561 = vunpack.c.h.b16 %v102
  %v562 = vunpack.c.l.b16 %v103
  %v563 = vunpack.c.h.b16 %v103
  %v564 = vunpack.c.l.b16 %v104
  %v565 = vunpack.c.h.b16 %v104
  %v566 = vunpack.c.l.b16 %v105
  %v567 = vunpack.c.h.b16 %v105
  %v568 = vunpack.c.l.b16 %v106
  %v569 = vunpack.c.h.b16 %v106
  %v570 = vunpack.c.l.b16 %v107
  %v571 = vunpack.c.h.b16 %v107
  %v572 = vunpack.c.l.b16 %v108
  %v573 = vunpack.c.h.b16 %v108
  %v574 = vunpack.c.l.b16 %v109
  %v575 = vunpack.c.h.b16 %v109
  %v576 = vunpack.c.l.b16 %v110
  %v577 = vunpack.c.h.b16 %v110
  %v578 = vunpack.c.l.b16 %v111
  %v579 = vunpack.c.h.b16 %v111
  %v580 = vunpack.c.l.b16 %v112
  %v581 = vunpack.c.h.b16 %v112
  %v582 = vunpack.c.l.b16 %v113
  %v583 = vunpack.c.h.b16 %v113
  %v584 = vunpack.c.l.b16 %v114
  %v585 = vunpack.c.h.b16 %v114
  %v586 = vunpack.c.l.b16 %v115
  %v587 = vunpack.c.h.b16 %v115
  %v588 = vunpack.c.l.b16 %v116
  %v589 = vunpack.c.h.b16 %v116
  %v590 = vunpack.c.l.b16 %v117
  %v591 = vunpack.c.h.b16 %v117
  %v592 = vunpack.c.l.b16 %v118
  %v593 = vunpack.c.h.b16 %v118
  %v594 = vunpack.c.l.b16 %v119
  %v595 = vunpack.c.h.b16 %v119
  %v596 = vunpack.c.l.b16 %v120
  %v597 = vunpack.c.h.b16 %v120
  %v598 = vunpack.c.l.b16 %v121
  %v599 = vunpack.c.h.b16 %v121
  %v600 = vunpack.c.l.b16 %v122
  %v601 = vunpack.c.h.b16 %v122
  %v602 = vunpack.c.l.b16 %v123
  %v603 = vunpack.c.h.b16 %v123
  %v604 = vunpack.c.l.b16 %v124
  %v605 = vunpack.c.h.b16 %v124
  %v606 = vunpack.c.l.b16 %v125
  %v607 = vunpack.c.h.b16 %v125
  %v608 = vunpack.c.l.b16 %v126
  %v609 = vunpack.c.h.b16 %v126
  %v610 = vunpack.c.l.b16 %v127
  %v611 = vunpack.c.h.b16 %v127
  %v612 = vunpack.c.l.b16 %v128
  %v613 = vunpack.c.h.b16 %v128
  %v614 = vunpack.c.l.b16 %v129
  %v615 = vunpack.c.h.b16 %v129
  %v616 = vunpack.c.l.b16 %v130
  %v617 = vunpack.c.h.b16 %v130
  %v618 = vunpack.c.l.b16 %v131
  %v619 = vunpack.c.h.b16 %v131
  %v620 = vunpack.c.l.b16 %v132
  %v621 = vunpack.c.h.b16 %v132
  %v622 = vunpack.c.l.b16 %v133
  %v623 = vunpack.c.h.b16 %v133
  %v624 = vunpack.c.l.b16 %v134
  %v625 = vunpack.c.h.b16 %v134
  %v626 = vunpack.c.l.b16 %v135
  %v627 = vunpack.c.h.b16 %v135
  %v628 = vunpack.c.l.b16 %v136
  %v629 = vunpack.c.h.b16 %v136
  %v630 = vunpack.c.l.b16 %v137
  %v631 = vunpack.c.h.b16 %v137
  %v632 = vunpack.c.l.b16 %v138
  %v633 = vunpack.c.h.b16 %v138
  %v634 = vunpack.c.l.b16 %v139
  %v635 = vunpack.c.h.b16 %v139
  %v636 = vunpack.c.l.b16 %v140
  %v637 = vunpack.c.h.b16 %v140
  %v638 = vunpack.c.l.b16 %v141
  %v639 = vunpack.c.h.b16 %v141
  %v640 = vunpack.c.l.b16 %v142
  %v641 = vunpack.c.h.b16 %v142
  %v642 = vunpack.c.l.b16 %v143
  %v643 = vunpack.c.h.b16 %v143
  %v644 = vunpack.c.l.b16 %v144
  %v645 = vunpack.c.h.b16 %v144
  %v646 = vunpack.c.l.b16 %v145
  %v647 = vunpack.c.h.b16 %v145
  %v648 = vunpack.c.l.b16 %v146
  %v649 = vunpack.c.h.b16 %v146
  %v650 = vunpack.c.l.b16 %v147
  %v651 = vunpack.c.h.b16 %v147
  %v652 = vunpack.c.l.b16 %v148
  %v653 = vunpack.c.h.b16 %v148
  %v654 = vunpack.c.l.b16 %v149
  %v655 = vunpack.c.h.b16 %v149
  %v656 = vunpack.c.l.b16 %v150
  %v657 = vunpack.c.h.b16 %v150
  %v658 = vunpack.c.l.b16 %v151
  %v659 = vunpack.c.h.b16 %v151
  %v660 = vunpack.c.l.b16 %v152
  %v661 = vunpack.c.h.b16 %v152
  %v662 = vunpack.c.l.b16 %v153
  %v663 = vunpack.c.h.b16 %v153
  %v664 = vunpack.c.l.b16 %v154
  %v665 = vunpack.c.h.b16 %v154
  %v666 = vunpack.c.l.b16 %v155
  %v667 = vunpack.c.h.b16 %v155
  %v668 = vunpack.c.l.b16 %v156
  %v669 = vunpack.c.h.b16 %v156
  %v670 = vunpack.c.l.b16 %v157
  %v671 = vunpack.c.h.b16 %v157
  %v672 = vunpack.c.l.b16 %v158
  %v673 = vunpack.c.h.b16 %v158
  %v674 = vunpack.c.l.b16 %v159
  %v675 = vunpack.c.h.b16 %v159
  %v676 = vunpack.c.l.b16 %v160
  %v677 = vunpack.c.h.b16 %v160
  %v678 = vunpack.c.l.b16 %v161
  %v679 = vunpack.c.h.b16 %v161
  %v680 = vunpack.c.l.b16 %v162
  %v681 = vunpack.c.h.b16 %v162
  %v682 = vunpack.c.l.b16 %v163
  %v683 = vunpack.c.h.b16 %v163
  %v684 = vunpack.c.l.b16 %v164
  %v685 = vunpack.c.h.b16 %v164
  %v686 = vunpack.c.l.b16 %v165
  %v687 = vunpack.c.h.b16 %v165
  %v688 = vunpack.c.l.b16 %v166
  %v689 = vunpack.c.h.b16 %v166
  %v690 = vunpack.c.l.b16 %v167
  %v691 = vunpack.c.h.b16 %v167
  %v692 = vunpack.c.l.b16 %v168
  %v693 = vunpack.c.h.b16 %v168
  %v694 = vunpack.c.l.b16 %v169
  %v695 = vunpack.c.h.b16 %v169
  %v696 = vunpack.c.l.b16 %v170
  %v697 = vunpack.c.h.b16 %v170
  %v698 = vunpack.c.l.b16 %v171
  %v699 = vunpack.c.h.b16 %v171
  %v700 = vunpack.c.l.b16 %v172
  %v701 = vunpack.c.h.b16 %v172
  %v702 = vunpack.c.l.b16 %v173
  %v703 = vunpack.c.h.b16 %v173
  %v704 = vunpack.c.l.b16 %v174
  %v705 = vunpack.c.h.b16 %v174
  %v706 = vunpack.c.l.b16 %v175
  %v707 = vunpack.c.h.b16 %v175
  %v708 = vunpack.c.l.b16 %v176
  %v709 = vunpack.c.h.b16 %v176
  %v710 = vunpack.c.l.b16 %v177
  %v711 = vunpack.c.h.b16 %v177
  %v712 = vunpack.c.l.b16 %v178
  %v713 = vunpack.c.h.b16 %v178
  %v714 = vunpack.c.l.b16 %v179
  %v715 = vunpack.c.h.b16 %v179
  %v716 = vunpack.c.l.b16 %v180
  %v717 = vunpack.c.h.b16 %v180
  %v718 = vunpack.c.l.b16 %v181
  %v719 = vunpack.c.h.b16 %v181
  %v720 = vunpack.c.l.b16 %v182
  %v721 = vunpack.c.h.b16 %v182
  %v722 = vunpack.c.l.b16 %v183
  %v723 = vunpack.c.h.b16 %v183
  %v724 = vunpack.c.l.b16 %v184
  %v725 = vunpack.c.h.b16 %v184
  %v726 = vunpack.c.l.b16 %v185
  %v727 = vunpack.c.h.b16 %v185
  %v728 = vunpack.c.l.b16 %v186
  %v729 = vunpack.c.h.b16 %v186
  %v730 = vunpack.c.l.b16 %v187
  %v731 = vunpack.c.h.b16 %v187
  %v732 = vunpack.c.l.b16 %v188
  %v733 = vunpack.c.h.b16 %v188
  %v734 = vunpack.c.l.b16 %v189
  %v735 = vunpack.c.h.b16 %v189
  %v736 = vunpack.c.l.b16 %v190
  %v737 = vunpack.c.h.b16 %v190
  %v738 = vunpack.c.l.b16 %v191
  %v739 = vunpack.c.h.b16 %v191
  %v740 = vunpack.c.l.b16 %v192
  %v741 = vunpack.c.h.b16 %v192
  %v742 = vunpack.c.l.b16 %v193
  %v743 = vunpack.c.h.b16 %v193
  %v744 = vunpack.c.l.b16 %v194
  %v745 = vunpack.c.h.b16 %v194
  %v746 = vunpack.c.l.b16 %v195
  %v747 = vunpack.c.h.b16 %v195
  %v748 = vunpack.c.l.b16 %v196
  %v749 = vunpack.c.h.b16 %v196
  %v750 = vunpack.c.l.b16 %v197
  %v751 = vunpack.c.h.b16 %v197
  %v752 = vunpack.c.l.b16 %v198
  %v753 = vunpack.c.h.b16 %v198
  %v754 = vunpack.c.l.b16 %v199
  %v755 = vunpack.c.h.b16 %v199
  %v756 = vunpack.c.l.b16 %v200
  %v757 = vunpack.c.h.b16 %v200
  %v758 = vunpack.c.l.b16 %v201
  %v759 = vunpack.c.h.b16 %v201
  %v760 = vunpack.c.l.b16 %v202
  %v761 = vunpack.c.h.b16 %v202
  %v762 = vunpack.c.l.b16 %v203
  %v763 = vunpack.c.h.b16 %v203
  %v764 = vunpack.c.l.b16 %v204
  %v765 = vunpack.c.h.b16 %v204
  %v766 = vunpack.c.l.b16 %v205
  %v767 = vunpack.c.h.b16 %v205
  %v768 = vunpack.c.l.b16 %v206
  %v769 = vunpack.c.h.b16 %v206
  %v770 = vunpack.c.l.b16 %v207
  %v771 = vunpack.c.h.b16 %v207
  %v772 = vunpack.c.l.b16 %v208
  %v773 = vunpack.c.h.b16 %v208
  %v774 = vunpack.c.l.b16 %v209
  %v775 = vunpack.c.h.b16 %v209
  %v776 = vunpack.c.l.b16 %v210
  %v777 = vunpack.c.h.b16 %v210
  %v778 = vunpack.c.l.b16 %v211
  %v779 = vunpack.c.h.b16 %v211
  %v780 = vunpack.c.l.b16 %v212
  %v781 = vunpack.c.h.b16 %v212
  %v782 = vunpack.c.l.b16 %v213
  %v783 = vunpack.c.h.b16 %v213
  %v784 = vunpack.c.l.b16 %v214
  %v785 = vunpack.c.h.b16 %v214
  %v786 = vunpack.c.l.b16 %v215
  %v787 = vunpack.c.h.b16 %v215
  %v788 = vunpack.c.l.b16 %v216
  %v789 = vunpack.c.h.b16 %v216
  %v790 = vunpack.c.l.b16 %v217
  %v791 = vunpack.c.h.b16 %v217
  %v792 = vunpack.c.l.b16 %v218
  %v793 = vunpack.c.h.b16 %v218
  %v794 = vunpack.c.l.b16 %v219
  %v795 = vunpack.c.h.b16 %v219
  %v796 = vunpack.c.l.b16 %v220
  %v797 = vunpack.c.h.b16 %v220
  %v798 = vunpack.c.l.b16 %v221
  %v799 = vunpack.c.h.b16 %v221
  %v800 = vunpack.c.l.b16 %v222
  %v801 = vunpack.c.h.b16 %v222
  %v802 = vunpack.c.l.b16 %v223
  %v803 = vunpack.c.h.b16 %v223
  %v804 = vunpack.c.l.b16 %v224
  %v805 = vunpack.c.h.b16 %v224
  %v806 = vunpack.c.l.b16 %v225
  %v807 = vunpack.c.h.b16 %v225
  %v808 = vunpack.c.l.b16 %v226
  %v809 = vunpack.c.h.b16 %v226
  %v810 = vunpack.c.l.b16 %v227
  %v811 = vunpack.c.h.b16 %v227
  %v812 = vunpack.c.l.b16 %v228
  %v813 = vunpack.c.h.b16 %v228
  %v814 = vunpack.c.l.b16 %v229
  %v815 = vunpack.c.h.b16 %v229
  %v816 = vunpack.c.l.b16 %v230
  %v817 = vunpack.c.h.b16 %v230
  %v818 = vunpack.c.l.b16 %v231
  %v819 = vunpack.c.h.b16 %v231
  %v820 = vunpack.c.l.b16 %v232
  %v821 = vunpack.c.h.b16 %v232
  %v822 = vunpack.c.l.b16 %v233
  %v823 = vunpack.c.h.b16 %v233
  %v824 = vunpack.c.l.b16 %v234
  %v825 = vunpack.c.h.b16 %v234
  %v826 = vunpack.c.l.b16 %v235
  %v827 = vunpack.c.h.b16 %v235
  %v828 = vunpack.c.l.b16 %v236
  %v829 = vunpack.c.h.b16 %v236
  %v830 = vunpack.c.l.b16 %v237
  %v831 = vunpack.c.h.b16 %v237
  %v832 = vunpack.c.l.b16 %v238
  %v833 = vunpack.c.h.b16 %v238
  %v834 = vunpack.c.l.b16 %v239
  %v835 = vunpack.c.h.b16 %v239
  %v836 = vunpack.c.l.b16 %v240
  %v837 = vunpack.c.h.b16 %v240
  %v838 = vunpack.c.l.b16 %v241
  %v839 = vunpack.c.h.b16 %v241
  %v840 = vunpack.c.l.b16 %v242
  %v841 = vunpack.c.h.b16 %v242
  %v842 = vunpack.c.l.b16 %v243
  %v843 = vunpack.c.h.b16 %v243
  %v844 = vunpack.c.l.b16 %v244
  %v845 = vunpack.c.h.b16 %v244
  %v846 = vunpack.c.l.b16 %v245
  %v847 = vunpack.c.h.b16 %v245
  %v848 = vunpack.c.l.b16 %v246
  %v849 = vunpack.c.h.b16 %v246
  %v850 = vunpack.c.l.b16 %v247
  %v851 = vunpack.c.h.b16 %v247
  %v852 = vunpack.c.l.b16 %v248
  %v853 = vunpack.c.h.b16 %v248
  %v854 = vunpack.c.l.b16 %v249
  %v855 = vunpack.c.h.b16 %v249
  %v856 = vunpack.c.l.b16 %v250
  %v857 = vunpack.c.h.b16 %v250
  %v858 = vunpack.c.l.b16 %v251
  %v859 = vunpack.c.h.b16 %v251
  %v860 = vunpack.c.l.b16 %v252
  %v861 = vunpack.c.h.b16 %v252
  %v862 = vunpack.c.l.b16 %v253
  %v863 = vunpack.c.h.b16 %v253
  %v864 = vunpack.c.l.b16 %v254
  %v865 = vunpack.c.h.b16 %v254
  %v866 = vunpack.c.l.b16 %v255
  %v867 = vunpack.c.h.b16 %v255
  %v868 = vpack.c.b16 %v480, %v476
  %v869 = vpack.c.b16 %v481, %v477
  %v870 = vpack.c.b16 %v482, %v478
  %v871 = vpack.c.b16 %v483, %v479
  %v872 = vpack.c.b16 %v488, %v484
  %v873 = vpack.c.b16 %v489, %v485
  %v874 = vpack.c.b16 %v490, %v486
  %v875 = vpack.c.b16 %v491, %v487
  %v876 = vpack.c.b16 %v496, %v492
  %v877 = vpack.c.b16 %v497, %v493
  %v878 = vpack.c.b16 %v498, %v494
  %v879 = vpack.c.b16 %v499, %v495
  %v880 = vpack.c.b16 %v504, %v500
  %v881 = vpack.c.b16 %v505, %v501
  %v882 = vpack.c.b16 %v506, %v502
  %v883 = vpack.c.b16 %v507, %v503
  %v884 = vpack.c.b16 %v512, %v508
  %v885 = vpack.c.b16 %v513, %v509
  %v886 = vpack.c.b16 %v514, %v510
  %v887 = vpack.c.b16 %v515, %v511
  %v888 = vpack.c.b16 %v520, %v516
  %v889 = vpack.c.b16 %v521, %v517
  %v890 = vpack.c.b16 %v522, %v518
  %v891 = vpack.c.b16 %v523, %v519
  %v892 = vpack.c.b16 %v528, %v524
  %v893 = vpack.c.b16 %v529, %v525
  %v894 = vpack.c.b16 %v530, %v526
  %v895 = vpack.c.b16 %v531, %v527
  %v896 = vpack.c.b16 %v536, %v532
  %v897 = vpack.c.b16 %v537, %v533
  %v898 = vpack.c.b16 %v538, %v534
  %v899 = vpack.c.b16 %v539, %v535
  %v900 = vpack.c.b16 %v544, %v540
  %v901 = vpack.c.b16 %v545, %v541
  %v902 = vpack.c.b16 %v546, %v542
  %v903 = vpack.c.b16 %v547, %v543
  %v904 = vpack.c.b16 %v552, %v548
  %v905 = vpack.c.b16 %v553, %v549
  %v906 = vpack.c.b16 %v554, %v550
  %v907 = vpack.c.b16 %v555, %v551
  %v908 = vpack.c.b16 %v560, %v556
  %v909 = vpack.c.b16 %v561, %v557
  %v910 = vpack.c.b16 %v562, %v558
  %v911 = vpack.c.b16 %v563, %v559
  %v912 = vpack.c.b16 %v568, %v564
  %v913 = vpack.c.b16 %v569, %v565
  %v914 = vpack.c.b16 %v570, %v566
  %v915 = vpack.c.b16 %v571, %v567
  %v916 = vpack.c.b16 %v576, %v572
  %v917 = vpack.c.b16 %v577, %v573
  %v918 = vpack.c.b16 %v578, %v574
  %v919 = vpack.c.b16 %v579, %v575
  %v920 = vpack.c.b16 %v584, %v580
  %v921 = vpack.c.b16 %v585, %v581
  %v922 = vpack.c.b16 %v586, %v582
  %v923 = vpack.c.b16 %v587, %v583
  %v924 = vpack.c.b16 %v592, %v588
  %v925 = vpack.c.b16 %v593, %v589
  %v926 = vpack.c.b16 %v594, %v590
  %v927 = vpack.c.b16 %v595, %v591
  %v928 = vpack.c.b16 %v600, %v596
  %v929 = vpack.c.b16 %v601, %v597
  %v930 = vpack.c.b16 %v602, %v598
  %v931 = vpack.c.b16 %v603, %v599
  %v932 = vpack.c.b16 %v608, %v604
  %v933 = vpack.c.b16 %v609, %v605
  %v934 = vpack.c.b16 %v610, %v606
  %v935 = vpack.c.b16 %v611, %v607
  %v936 = vpack.c.b16 %v616, %v612
  %v937 = vpack.c.b16 %v617, %v613
  %v938 = vpack.c.b16 %v618, %v614
  %v939 = vpack.c.b16 %v619, %v615
  %v940 = vpack.c.b16 %v624, %v620
  %v941 = vpack.c.b16 %v625, %v621
  %v942 = vpack.c.b16 %v626, %v622
  %v943 = vpack.c.b16 %v627, %v623
  %v944 = vpack.c.b16 %v632, %v628
  %v945 = vpack.c.b16 %v633, %v629
  %v946 = vpack.c.b16 %v634, %v630
  %v947 = vpack.c.b16 %v635, %v631
  %v948 = vpack.c.b16 %v640, %v636
  %v949 = vpack.c.b16 %v641, %v637
  %v950 = vpack.c.b16 %v642, %v638
  %v951 = vpack.c.b16 %v643, %v639
  %v952 = vpack.c.b16 %v648, %v644
  %v953 = vpack.c.b16 %v649, %v645
  %v954 = vpack.c.b16 %v650, %v646
  %v955 = vpack.c.b16 %v651, %v647
  %v956 = vpack.c.b16 %v656, %v652
  %v957 = vpack.c.b16 %v657, %v653
  %v958 = vpack.c.b16 %v658, %v654
  %v959 = vpack.c.b16 %v659, %v655
  %v960 = vpack.c.b16 %v664, %v660
  %v961 = vpack.c.b16 %v665, %v661
  %v962 = vpack.c.b16 %v666, %v662
  %v963 = vpack.c.b16 %v667, %v663
  %v964 = vpack.c.b16 %v672, %v668
  %v965 = vpack.c.b16 %v673, %v669
  %v966 = vpack.c.b16 %v674, %v670
  %v967 = vpack.c.b16 %v675, %v671
  %v968 = vpack.c.b16 %v680, %v676
  %v969 = vpack.c.b16 %v681, %v677
  %v970 = vpack.c.b16 %v682, %v678
  %v971 = vpack.c.b16 %v683, %v679
  %v972 = vpack.c.b16 %v688, %v684
  %v973 = vpack.c.b16 %v689, %v685
  %v974 = vpack.c.b16 %v690, %v686
  %v975 = vpack.c.b16 %v691, %v687
  %v976 = vpack.c.b16 %v696, %v692
  %v977 = vpack.c.b16 %v697, %v693
  %v978 = vpack.c.b16 %v698, %v694
  %v979 = vpack.c.b16 %v699, %v695
  %v980 = vpack.c.b16 %v704, %v700
  %v981 = vpack.c.b16 %v705, %v701
  %v982 = vpack.c.b16 %v706, %v702
  %v983 = vpack.c.b16 %v707, %v703
  %v984 = vpack.c.b16 %v712, %v708
  %v985 = vpack.c.b16 %v713, %v709
  %v986 = vpack.c.b16 %v714, %v710
  %v987 = vpack.c.b16 %v715, %v711
  %v988 = vpack.c.b16 %v720, %v716
  %v989 = vpack.c.b16 %v721, %v717
  %v990 = vpack.c.b16 %v722, %v718
  %v991 = vpack.c.b16 %v723, %v719
  %v992 = vpack.c.b16 %v728, %v724
  %v993 = vpack.c.b16 %v729, %v725
  %v994 = vpack.c.b16 %v730, %v726
  %v995 = vpack.c.b16 %v731, %v727
  %v996 = vpack.c.b16 %v736, %v732
  %v997 = vpack.c.b16 %v737, %v733
  %v998 = vpack.c.b16 %v738, %v734
  %v999 = vpack.c.b16 %v739, %v735
  %v1000 = vpack.c.b16 %v744, %v740
  %v1001 = vpack.c.b16 %v745, %v741
  %v1002 = vpack.c.b16 %v746, %v742
  %v1003 = vpack.c.b16 %v747, %v743
  %v1004 = vpack.c.b16 %v752, %v748
  %v1005 = vpack.c.b16 %v753, %v749
  %v1006 = vpack.c.b16 %v754, %v750
  %v1007 = vpack.c.b16 %v755, %v751
  %v1008 = vpack.c.b16 %v760, %v756
  %v1009 = vpack.c.b16 %v761, %v757
  %v1010 = vpack.c.b16 %v762, %v758
  %v1011 = vpack.c.b16 %v763, %v759
  %v1012 = vpack.c.b16 %v768, %v764
  %v1013 = vpack.c.b16 %v769, %v765
  %v1014 = vpack.c.b16 %v770, %v766
  %v1015 = vpack.c.b16 %v771, %v767
  %v1016 = vpack.c.b16 %v776, %v772
  %v1017 = vpack.c.b16 %v777, %v773
  %v1018 = vpack.c.b16 %v778, %v774
  %v1019 = vpack.c.b16 %v779, %v775
  %v1020 = vpack.c.b16 %v784, %v780
  %v1021 = vpack.c.b16 %v785, %v781
  %v1022 = vpack.c.b16 %v786, %v782
  %v1023 = vpack.c.b16 %v787, %v783
  %v1024 = vpack.c.b16 %v792, %v788
  %v1025 = vpack.c.b16 %v793, %v789
  %v1026 = vpack.c.b16 %v794, %v790
  %v1027 = vpack.c.b16 %v795, %v791
  %v1028 = vpack.c.b16 %v800, %v796
  %v1029 = vpack.c.b16 %v801, %v797
  %v1030 = vpack.c.b16 %v802, %v798
  %v1031 = vpack.c.b16 %v803, %v799
  %v1032 = vpack.c.b16 %v808, %v804
  %v1033 = vpack.c.b16 %v809, %v805
  %v1034 = vpack.c.b16 %v810, %v806
  %v1035 = vpack.c.b16 %v811, %v807
  %v1036 = vpack.c.b16 %v816, %v812
  %v1037 = vpack.c.b16 %v817, %v813
  %v1038 = vpack.c.b16 %v818, %v814
  %v1039 = vpack.c.b16 %v819, %v815
  %v1040 = vpack.c.b16 %v824, %v820
  %v1041 = vpack.c.b16 %v825, %v821
  %v1042 = vpack.c.b16 %v826, %v822
  %v1043 = vpack.c.b16 %v827, %v823
  %v1044 = vpack.c.b16 %v832, %v828
  %v1045 = vpack.c.b16 %v833, %v829
  %v1046 = vpack.c.b16 %v834, %v830
  %v1047 = vpack.c.b16 %v835, %v831
  %v1048 = vpack.c.b16 %v840, %v836
  %v1049 = vpack.c.b16 %v841, %v837
  %v1050 = vpack.c.b16 %v842, %v838
  %v1051 = vpack.c.b16 %v843, %v839
  %v1052 = vpack.c.b16 %v848, %v844
  %v1053 = vpack.c.b16 %v849, %v845
  %v1054 = vpack.c.b16 %v850, %v846
  %v1055 = vpack.c.b16 %v851, %v847
  %v1056 = vpack.c.b16 %v856, %v852
  %v1057 = vpack.c.b16 %v857, %v853
  %v1058 = vpack.c.b16 %v858, %v854
  %v1059 = vpack.c.b16 %v859, %v855
  %v1060 = vpack.c.b16 %v864, %v860
  %v1061 = vpack.c.b16 %v865, %v861
  %v1062 = vpack.c.b16 %v866, %v862
  %v1063 = vpack.c.b16 %v867, %v863
  %vm1260 = vcmask 130048
  %v1262 = vsel %vm1260, %v273, 0
  %1264 = vmatprep.subr.bf16.mxu0 %v869
  %1265 = vmatpush1.bf16.msra.mxu0 %v868
  %1266 = vmatprep.subr.bf16.mxu0 %v873
  %1267 = vmatpush1.bf16.msra.mxu0 %v872
  %1268 = vmatprep.subr.bf16.mxu0 %v877
  %1269 = vmatpush1.bf16.msra.mxu0 %v876
  %1270 = vmatprep.subr.bf16.mxu0 %v881
  %1271 = vmatpush1.bf16.msra.mxu0 %v880
  %1272 = vmatprep.subr.bf16.mxu0 %v885
  %1273 = vmatpush1.bf16.msra.mxu0 %v884
  %1274 = vmatprep.subr.bf16.mxu0 %v889
  %1275 = vmatpush1.bf16.msra.mxu0 %v888
  %1276 = vmatprep.subr.bf16.mxu0 %v893
  %1277 = vmatpush1.bf16.msra.mxu0 %v892
  %1278 = vmatprep.subr.bf16.mxu0 %v897
  %1279 = vmatpush1.bf16.msra.mxu0 %v896
  %1280 = vmatprep.subr.bf16.mxu0 %v901
  %1281 = vmatpush1.bf16.msra.mxu0 %v900
  %1282 = vmatprep.subr.bf16.mxu0 %v905
  %1283 = vmatpush1.bf16.msra.mxu0 %v904
  %1284 = vmatprep.subr.bf16.mxu0 %v909
  %1285 = vmatpush1.bf16.msra.mxu0 %v908
  %1286 = vmatprep.subr.bf16.mxu0 %v913
  %1287 = vmatpush1.bf16.msra.mxu0 %v912
  %1288 = vmatprep.subr.bf16.mxu0 %v917
  %1289 = vmatpush1.bf16.msra.mxu0 %v916
  %1290 = vmatprep.subr.bf16.mxu0 %v921
  %1291 = vmatpush1.bf16.msra.mxu0 %v920
  %1292 = vmatprep.subr.bf16.mxu0 %v925
  %1293 = vmatpush1.bf16.msra.mxu0 %v924
  %1294 = vmatprep.subr.bf16.mxu0 %v929
  %1295 = vmatpush1.bf16.msra.mxu0 %v928
  %1296 = vmatprep.mubr.bf16.mxu0 %v268
  %1297 = vmatmul.mubr.bf16.gmra.mrb[0].mxu0 %v267
  %v1298 = vpop.f32.mrb[0].mxu0
  %v1299 = vadd.f32 0.0, %v1298
  %v1300 = vpop.f32.mrb[0].mxu0
  %v1301 = vadd.f32 0.0, %v1300
  %v1302 = vpop.f32.mrb[0].mxu0
  %v1303 = vpop.f32.mrb[0].mxu0
  %1304 = vdwg.mxu0
  %1305 = vmatprep.subr.bf16.mxu0 %v933
  %1306 = vmatpush1.bf16.msra.mxu0 %v932
  %1307 = vmatprep.subr.bf16.mxu0 %v937
  %1308 = vmatpush1.bf16.msra.mxu0 %v936
  %1309 = vmatprep.subr.bf16.mxu0 %v941
  %1310 = vmatpush1.bf16.msra.mxu0 %v940
  %1311 = vmatprep.subr.bf16.mxu0 %v945
  %1312 = vmatpush1.bf16.msra.mxu0 %v944
  %1313 = vmatprep.subr.bf16.mxu0 %v949
  %1314 = vmatpush1.bf16.msra.mxu0 %v948
  %1315 = vmatprep.subr.bf16.mxu0 %v953
  %1316 = vmatpush1.bf16.msra.mxu0 %v952
  %1317 = vmatprep.subr.bf16.mxu0 %v957
  %1318 = vmatpush1.bf16.msra.mxu0 %v956
  %1319 = vmatprep.subr.bf16.mxu0 %v961
  %1320 = vmatpush1.bf16.msra.mxu0 %v960
  %1321 = vmatprep.subr.bf16.mxu0 %v965
  %1322 = vmatpush1.bf16.msra.mxu0 %v964
  %1323 = vmatprep.subr.bf16.mxu0 %v969
  %1324 = vmatpush1.bf16.msra.mxu0 %v968
  %1325 = vmatprep.subr.bf16.mxu0 %v973
  %1326 = vmatpush1.bf16.msra.mxu0 %v972
  %1327 = vmatprep.subr.bf16.mxu0 %v977
  %1328 = vmatpush1.bf16.msra.mxu0 %v976
  %1329 = vmatprep.subr.bf16.mxu0 %v981
  %1330 = vmatpush1.bf16.msra.mxu0 %v980
  %1331 = vmatprep.subr.bf16.mxu0 %v985
  %1332 = vmatpush1.bf16.msra.mxu0 %v984
  %1333 = vmatprep.subr.bf16.mxu0 %v989
  %1334 = vmatpush1.bf16.msra.mxu0 %v988
  %1335 = vmatprep.subr.bf16.mxu0 %v993
  %1336 = vmatpush1.bf16.msra.mxu0 %v992
  %1337 = vmatprep.mubr.bf16.mxu0 %v270
  %1338 = vmatmul.mubr.bf16.gmra.mrb[0].mxu0 %v269
  %v1339 = vpop.f32.mrb[0].mxu0
  %v1340 = vadd.f32 %v1299, %v1339
  %v1341 = vpop.f32.mrb[0].mxu0
  %v1342 = vadd.f32 %v1301, %v1341
  %v1343 = vpop.f32.mrb[0].mxu0
  %v1344 = vpop.f32.mrb[0].mxu0
  %1345 = vdwg.mxu0
  %1346 = vmatprep.subr.bf16.mxu0 %v997
  %1347 = vmatpush1.bf16.msra.mxu0 %v996
  %1348 = vmatprep.subr.bf16.mxu0 %v1001
  %1349 = vmatpush1.bf16.msra.mxu0 %v1000
  %1350 = vmatprep.subr.bf16.mxu0 %v1005
  %1351 = vmatpush1.bf16.msra.mxu0 %v1004
  %1352 = vmatprep.subr.bf16.mxu0 %v1009
  %1353 = vmatpush1.bf16.msra.mxu0 %v1008
  %1354 = vmatprep.subr.bf16.mxu0 %v1013
  %1355 = vmatpush1.bf16.msra.mxu0 %v1012
  %1356 = vmatprep.subr.bf16.mxu0 %v1017
  %1357 = vmatpush1.bf16.msra.mxu0 %v1016
  %1358 = vmatprep.subr.bf16.mxu0 %v1021
  %1359 = vmatpush1.bf16.msra.mxu0 %v1020
  %1360 = vmatprep.subr.bf16.mxu0 %v1025
  %1361 = vmatpush1.bf16.msra.mxu0 %v1024
  %1362 = vmatprep.subr.bf16.mxu0 %v1029
  %1363 = vmatpush1.bf16.msra.mxu0 %v1028
  %1364 = vmatprep.subr.bf16.mxu0 %v1033
  %1365 = vmatpush1.bf16.msra.mxu0 %v1032
  %1366 = vmatprep.subr.bf16.mxu0 %v1037
  %1367 = vmatpush1.bf16.msra.mxu0 %v1036
  %1368 = vmatprep.subr.bf16.mxu0 %v1041
  %1369 = vmatpush1.bf16.msra.mxu0 %v1040
  %1370 = vmatprep.subr.bf16.mxu0 %v1045
  %1371 = vmatpush1.bf16.msra.mxu0 %v1044
  %1372 = vmatprep.subr.bf16.mxu0 %v1049
  %1373 = vmatpush1.bf16.msra.mxu0 %v1048
  %1374 = vmatprep.subr.bf16.mxu0 %v1053
  %1375 = vmatpush1.bf16.msra.mxu0 %v1052
  %1376 = vmatprep.subr.bf16.mxu0 %v1057
  %1377 = vmatpush1.bf16.msra.mxu0 %v1056
  %1378 = vmatprep.mubr.bf16.mxu0 %v272
  %1379 = vmatmul.mubr.bf16.gmra.mrb[0].mxu0 %v271
  %v1380 = vpop.f32.mrb[0].mxu0
  %v1381 = vadd.f32 %v1340, %v1380
  %v1382 = vpop.f32.mrb[0].mxu0
  %v1383 = vadd.f32 %v1342, %v1382
  %v1384 = vpop.f32.mrb[0].mxu0
  %v1385 = vpop.f32.mrb[0].mxu0
  %1386 = vdwg.mxu0
  %1387 = vmatprep.subr.bf16.mxu0 %v1061
  %1388 = vmatpush1.bf16.msra.mxu0 %v1060
  %1389 = vmatprep.subr.bf16.mxu0 0
  %1390 = vmatpush1.bf16.msra.mxu0 0
  %1391 = vmatprep.subr.bf16.mxu0 0
  %1392 = vmatpush1.bf16.msra.mxu0 0
  %1393 = vmatprep.subr.bf16.mxu0 0
  %1394 = vmatpush1.bf16.msra.mxu0 0
  %1395 = vmatprep.subr.bf16.mxu0 0
  %1396 = vmatpush1.bf16.msra.mxu0 0
  %1397 = vmatprep.subr.bf16.mxu0 0
  %1398 = vmatpush1.bf16.msra.mxu0 0
  %1399 = vmatprep.subr.bf16.mxu0 0
  %1400 = vmatpush1.bf16.msra.mxu0 0
  %1401 = vmatprep.subr.bf16.mxu0 0
  %1402 = vmatpush1.bf16.msra.mxu0 0
  %1403 = vmatprep.subr.bf16.mxu0 0
  %1404 = vmatpush1.bf16.msra.mxu0 0
  %1405 = vmatprep.subr.bf16.mxu0 0
  %1406 = vmatpush1.bf16.msra.mxu0 0
  %1407 = vmatprep.subr.bf16.mxu0 0
  %1408 = vmatpush1.bf16.msra.mxu0 0
  %1409 = vmatprep.subr.bf16.mxu0 0
  %1410 = vmatpush1.bf16.msra.mxu0 0
  %1411 = vmatprep.subr.bf16.mxu0 0
  %1412 = vmatpush1.bf16.msra.mxu0 0
  %1413 = vmatprep.subr.bf16.mxu0 0
  %1414 = vmatpush1.bf16.msra.mxu0 0
  %1415 = vmatprep.subr.bf16.mxu0 0
  %1416 = vmatpush1.bf16.msra.mxu0 0
  %1417 = vmatprep.subr.bf16.mxu0 0
  %1418 = vmatpush1.bf16.msra.mxu0 0
  %1419 = vmatprep.mubr.bf16.mxu0 0
  %1420 = vmatmul.mubr.bf16.gmra.mrb[0].mxu0 %v1262
  %v1421 = vpop.f32.mrb[0].mxu0
  %v1422 = vadd.f32 %v1381, %v1421
  %v1423 = vpop.f32.mrb[0].mxu0
  %v1424 = vadd.f32 %v1383, %v1423
  %v1425 = vpop.f32.mrb[0].mxu0
  %v1426 = vpop.f32.mrb[0].mxu0
  %1427 = vdwg.mxu0
  %1428 = vmatprep.subr.bf16.mxu0 %v871
  %1429 = vmatpush1.bf16.msra.mxu0 %v870
  %1430 = vmatprep.subr.bf16.mxu0 %v875
  %1431 = vmatpush1.bf16.msra.mxu0 %v874
  %1432 = vmatprep.subr.bf16.mxu0 %v879
  %1433 = vmatpush1.bf16.msra.mxu0 %v878
  %1434 = vmatprep.subr.bf16.mxu0 %v883
  %1435 = vmatpush1.bf16.msra.mxu0 %v882
  %1436 = vmatprep.subr.bf16.mxu0 %v887
  %1437 = vmatpush1.bf16.msra.mxu0 %v886
  %1438 = vmatprep.subr.bf16.mxu0 %v891
  %1439 = vmatpush1.bf16.msra.mxu0 %v890
  %1440 = vmatprep.subr.bf16.mxu0 %v895
  %1441 = vmatpush1.bf16.msra.mxu0 %v894
  %1442 = vmatprep.subr.bf16.mxu0 %v899
  %1443 = vmatpush1.bf16.msra.mxu0 %v898
  %1444 = vmatprep.subr.bf16.mxu0 %v903
  %1445 = vmatpush1.bf16.msra.mxu0 %v902
  %1446 = vmatprep.subr.bf16.mxu0 %v907
  %1447 = vmatpush1.bf16.msra.mxu0 %v906
  %1448 = vmatprep.subr.bf16.mxu0 %v911
  %1449 = vmatpush1.bf16.msra.mxu0 %v910
  %1450 = vmatprep.subr.bf16.mxu0 %v915
  %1451 = vmatpush1.bf16.msra.mxu0 %v914
  %1452 = vmatprep.subr.bf16.mxu0 %v919
  %1453 = vmatpush1.bf16.msra.mxu0 %v918
  %1454 = vmatprep.subr.bf16.mxu0 %v923
  %1455 = vmatpush1.bf16.msra.mxu0 %v922
  %1456 = vmatprep.subr.bf16.mxu0 %v927
  %1457 = vmatpush1.bf16.msra.mxu0 %v926
  %1458 = vmatprep.subr.bf16.mxu0 %v931
  %1459 = vmatpush1.bf16.msra.mxu0 %v930
  %1460 = vmatprep.mubr.bf16.mxu0 %v268
  %1461 = vmatmul.mubr.bf16.gmra.mrb[0].mxu0 %v267
  %v1462 = vpop.f32.mrb[0].mxu0
  %v1463 = vadd.f32 0.0, %v1462
  %v1464 = vpop.f32.mrb[0].mxu0
  %v1465 = vadd.f32 0.0, %v1464
  %v1466 = vpop.f32.mrb[0].mxu0
  %v1467 = vpop.f32.mrb[0].mxu0
  %1468 = vdwg.mxu0
  %1469 = vmatprep.subr.bf16.mxu0 %v935
  %1470 = vmatpush1.bf16.msra.mxu0 %v934
  %1471 = vmatprep.subr.bf16.mxu0 %v939
  %1472 = vmatpush1.bf16.msra.mxu0 %v938
  %1473 = vmatprep.subr.bf16.mxu0 %v943
  %1474 = vmatpush1.bf16.msra.mxu0 %v942
  %1475 = vmatprep.subr.bf16.mxu0 %v947
  %1476 = vmatpush1.bf16.msra.mxu0 %v946
  %1477 = vmatprep.subr.bf16.mxu0 %v951
  %1478 = vmatpush1.bf16.msra.mxu0 %v950
  %1479 = vmatprep.subr.bf16.mxu0 %v955
  %1480 = vmatpush1.bf16.msra.mxu0 %v954
  %1481 = vmatprep.subr.bf16.mxu0 %v959
  %1482 = vmatpush1.bf16.msra.mxu0 %v958
  %1483 = vmatprep.subr.bf16.mxu0 %v963
  %1484 = vmatpush1.bf16.msra.mxu0 %v962
  %1485 = vmatprep.subr.bf16.mxu0 %v967
  %1486 = vmatpush1.bf16.msra.mxu0 %v966
  %1487 = vmatprep.subr.bf16.mxu0 %v971
  %1488 = vmatpush1.bf16.msra.mxu0 %v970
  %1489 = vmatprep.subr.bf16.mxu0 %v975
  %1490 = vmatpush1.bf16.msra.mxu0 %v974
  %1491 = vmatprep.subr.bf16.mxu0 %v979
  %1492 = vmatpush1.bf16.msra.mxu0 %v978
  %1493 = vmatprep.subr.bf16.mxu0 %v983
  %1494 = vmatpush1.bf16.msra.mxu0 %v982
  %1495 = vmatprep.subr.bf16.mxu0 %v987
  %1496 = vmatpush1.bf16.msra.mxu0 %v986
  %1497 = vmatprep.subr.bf16.mxu0 %v991
  %1498 = vmatpush1.bf16.msra.mxu0 %v990
  %1499 = vmatprep.subr.bf16.mxu0 %v995
  %1500 = vmatpush1.bf16.msra.mxu0 %v994
  %1501 = vmatprep.mubr.bf16.mxu0 %v270
  %1502 = vmatmul.mubr.bf16.gmra.mrb[0].mxu0 %v269
  %v1503 = vpop.f32.mrb[0].mxu0
  %v1504 = vadd.f32 %v1463, %v1503
  %v1505 = vpop.f32.mrb[0].mxu0
  %v1506 = vadd.f32 %v1465, %v1505
  %v1507 = vpop.f32.mrb[0].mxu0
  %v1508 = vpop.f32.mrb[0].mxu0
  %1509 = vdwg.mxu0
  %1510 = vmatprep.subr.bf16.mxu0 %v999
  %1511 = vmatpush1.bf16.msra.mxu0 %v998
  %1512 = vmatprep.subr.bf16.mxu0 %v1003
  %1513 = vmatpush1.bf16.msra.mxu0 %v1002
  %1514 = vmatprep.subr.bf16.mxu0 %v1007
  %1515 = vmatpush1.bf16.msra.mxu0 %v1006
  %1516 = vmatprep.subr.bf16.mxu0 %v1011
  %1517 = vmatpush1.bf16.msra.mxu0 %v1010
  %1518 = vmatprep.subr.bf16.mxu0 %v1015
  %1519 = vmatpush1.bf16.msra.mxu0 %v1014
  %1520 = vmatprep.subr.bf16.mxu0 %v1019
  %1521 = vmatpush1.bf16.msra.mxu0 %v1018
  %1522 = vmatprep.subr.bf16.mxu0 %v1023
  %1523 = vmatpush1.bf16.msra.mxu0 %v1022
  %1524 = vmatprep.subr.bf16.mxu0 %v1027
  %1525 = vmatpush1.bf16.msra.mxu0 %v1026
  %1526 = vmatprep.subr.bf16.mxu0 %v1031
  %1527 = vmatpush1.bf16.msra.mxu0 %v1030
  %1528 = vmatprep.subr.bf16.mxu0 %v1035
  %1529 = vmatpush1.bf16.msra.mxu0 %v1034
  %1530 = vmatprep.subr.bf16.mxu0 %v1039
  %1531 = vmatpush1.bf16.msra.mxu0 %v1038
  %1532 = vmatprep.subr.bf16.mxu0 %v1043
  %1533 = vmatpush1.bf16.msra.mxu0 %v1042
  %1534 = vmatprep.subr.bf16.mxu0 %v1047
  %1535 = vmatpush1.bf16.msra.mxu0 %v1046
  %1536 = vmatprep.subr.bf16.mxu0 %v1051
  %1537 = vmatpush1.bf16.msra.mxu0 %v1050
  %1538 = vmatprep.subr.bf16.mxu0 %v1055
  %1539 = vmatpush1.bf16.msra.mxu0 %v1054
  %1540 = vmatprep.subr.bf16.mxu0 %v1059
  %1541 = vmatpush1.bf16.msra.mxu0 %v1058
  %1542 = vmatprep.mubr.bf16.mxu0 %v272
  %1543 = vmatmul.mubr.bf16.gmra.mrb[0].mxu0 %v271
  %v1544 = vpop.f32.mrb[0].mxu0
  %v1545 = vadd.f32 %v1504, %v1544
  %v1546 = vpop.f32.mrb[0].mxu0
  %v1547 = vadd.f32 %v1506, %v1546
  %v1548 = vpop.f32.mrb[0].mxu0
  %v1549 = vpop.f32.mrb[0].mxu0
  %1550 = vdwg.mxu0
  %1551 = vmatprep.subr.bf16.mxu0 %v1063
  %1552 = vmatpush1.bf16.msra.mxu0 %v1062
  %1553 = vmatprep.subr.bf16.mxu0 0
  %1554 = vmatpush1.bf16.msra.mxu0 0
  %1555 = vmatprep.subr.bf16.mxu0 0
  %1556 = vmatpush1.bf16.msra.mxu0 0
  %1557 = vmatprep.subr.bf16.mxu0 0
  %1558 = vmatpush1.bf16.msra.mxu0 0
  %1559 = vmatprep.subr.bf16.mxu0 0
  %1560 = vmatpush1.bf16.msra.mxu0 0
  %1561 = vmatprep.subr.bf16.mxu0 0
  %1562 = vmatpush1.bf16.msra.mxu0 0
  %1563 = vmatprep.subr.bf16.mxu0 0
  %1564 = vmatpush1.bf16.msra.mxu0 0
  %1565 = vmatprep.subr.bf16.mxu0 0
  %1566 = vmatpush1.bf16.msra.mxu0 0
  %1567 = vmatprep.subr.bf16.mxu0 0
  %1568 = vmatpush1.bf16.msra.mxu0 0
  %1569 = vmatprep.subr.bf16.mxu0 0
  %1570 = vmatpush1.bf16.msra.mxu0 0
  %1571 = vmatprep.subr.bf16.mxu0 0
  %1572 = vmatpush1.bf16.msra.mxu0 0
  %1573 = vmatprep.subr.bf16.mxu0 0
  %1574 = vmatpush1.bf16.msra.mxu0 0
  %1575 = vmatprep.subr.bf16.mxu0 0
  %1576 = vmatpush1.bf16.msra.mxu0 0
  %1577 = vmatprep.subr.bf16.mxu0 0
  %1578 = vmatpush1.bf16.msra.mxu0 0
  %1579 = vmatprep.subr.bf16.mxu0 0
  %1580 = vmatpush1.bf16.msra.mxu0 0
  %1581 = vmatprep.subr.bf16.mxu0 0
  %1582 = vmatpush1.bf16.msra.mxu0 0
  %1583 = vmatprep.mubr.bf16.mxu0 0
  %1584 = vmatmul.mubr.bf16.gmra.mrb[0].mxu0 %v1262
  %v1585 = vpop.f32.mrb[0].mxu0
  %v1586 = vadd.f32 %v1545, %v1585
  %v1587 = vpop.f32.mrb[0].mxu0
  %v1588 = vadd.f32 %v1547, %v1587
  %v1589 = vpop.f32.mrb[0].mxu0
  %v1590 = vpop.f32.mrb[0].mxu0
  %1591 = vdwg.mxu0
  %v1592 = vld [vmem:[%s2] sm:$0xff]
  %v1593 = vld [vmem:[%s2 + $0x8] sm:$0xff]
  %v1594 = vld [vmem:[%s2 + $0x10] sm:$0xff]
  %v1595 = vld [vmem:[%s2 + $0x18] sm:$0xff]
  %v1596 = vld [vmem:[%s2 + $0x20] sm:$0xff]
  %v1597 = vld [vmem:[%s2 + $0x28] sm:$0xff]
  %v1598 = vld [vmem:[%s2 + $0x30] sm:$0xff]
  %v1599 = vld [vmem:[%s2 + $0x38] sm:$0xff]
  %v1600 = vld [vmem:[%s2 + $0x40] sm:$0xff]
  %v1601 = vld [vmem:[%s2 + $0x48] sm:$0xff]
  %v1602 = vld [vmem:[%s2 + $0x50] sm:$0xff]
  %v1603 = vld [vmem:[%s2 + $0x58] sm:$0xff]
  %v1604 = vld [vmem:[%s2 + $0x60] sm:$0xff]
  %v1605 = vld [vmem:[%s2 + $0x68] sm:$0xff]
  %v1606 = vld [vmem:[%s2 + $0x70] sm:$0xff]
  %v1607 = vld [vmem:[%s2 + $0x78] sm:$0xff]
  %v1608 = vld [vmem:[%s2 + $0x80] sm:$0xff]
  %v1609 = vld [vmem:[%s2 + $0x88] sm:$0xff]
  %v1610 = vld [vmem:[%s2 + $0x90] sm:$0xff]
  %v1611 = vld [vmem:[%s2 + $0x98] sm:$0xff]
  %v1612 = vld [vmem:[%s2 + $0xa0] sm:$0xff]
  %v1613 = vld [vmem:[%s2 + $0xa8] sm:$0xff]
  %v1614 = vld [vmem:[%s2 + $0xb0] sm:$0xff]
  %v1615 = vld [vmem:[%s2 + $0xb8] sm:$0xff]
  %v1616 = vld [vmem:[%s2 + $0xc0] sm:$0xff]
  %v1617 = vld [vmem:[%s2 + $0xc8] sm:$0xff]
  %v1618 = vld [vmem:[%s2 + $0xd0] sm:$0xff]
  %v1619 = vld [vmem:[%s2 + $0xd8] sm:$0xff]
  %v1620 = vld [vmem:[%s2 + $0xe0] sm:$0xff]
  %v1621 = vld [vmem:[%s2 + $0xe8] sm:$0xff]
  %v1622 = vld [vmem:[%s2 + $0xf0] sm:$0xff]
  %v1623 = vld [vmem:[%s2 + $0xf8] sm:$0xff]
  %v1624 = vld [vmem:[%s2 + $0x100] sm:$0xff]
  %v1625 = vld [vmem:[%s2 + $0x108] sm:$0xff]
  %v1626 = vld [vmem:[%s2 + $0x110] sm:$0xff]
  %v1627 = vld [vmem:[%s2 + $0x118] sm:$0xff]
  %v1628 = vld [vmem:[%s2 + $0x120] sm:$0xff]
  %v1629 = vld [vmem:[%s2 + $0x128] sm:$0xff]
  %v1630 = vld [vmem:[%s2 + $0x130] sm:$0xff]
  %v1631 = vld [vmem:[%s2 + $0x138] sm:$0xff]
  %v1632 = vld [vmem:[%s2 + $0x140] sm:$0xff]
  %v1633 = vld [vmem:[%s2 + $0x148] sm:$0xff]
  %v1634 = vld [vmem:[%s2 + $0x150] sm:$0xff]
  %v1635 = vld [vmem:[%s2 + $0x158] sm:$0xff]
  %v1636 = vld [vmem:[%s2 + $0x160] sm:$0xff]
  %v1637 = vld [vmem:[%s2 + $0x168] sm:$0xff]
  %v1638 = vld [vmem:[%s2 + $0x170] sm:$0xff]
  %v1639 = vld [vmem:[%s2 + $0x178] sm:$0xff]
  %v1640 = vld [vmem:[%s2 + $0x180] sm:$0xff]
  %v1641 = vld [vmem:[%s2 + $0x188] sm:$0xff]
  %v1642 = vld [vmem:[%s2 + $0x190] sm:$0xff]
  %v1643 = vld [vmem:[%s2 + $0x198] sm:$0xff]
  %v1644 = vld [vmem:[%s2 + $0x1a0] sm:$0xff]
  %v1645 = vld [vmem:[%s2 + $0x1a8] sm:$0xff]
  %v1646 = vld [vmem:[%s2 + $0x1b0] sm:$0xff]
  %v1647 = vld [vmem:[%s2 + $0x1b8] sm:$0xff]
  %v1648 = vld [vmem:[%s2 + $0x1c0] sm:$0xff]
  %v1649 = vld [vmem:[%s2 + $0x1c8] sm:$0xff]
  %v1650 = vld [vmem:[%s2 + $0x1d0] sm:$0xff]
  %v1651 = vld [vmem:[%s2 + $0x1d8] sm:$0xff]
  %v1652 = vld [vmem:[%s2 + $0x1e0] sm:$0xff]
  %v1653 = vld [vmem:[%s2 + $0x1e8] sm:$0xff]
  %v1654 = vld [vmem:[%s2 + $0x1f0] sm:$0xff]
  %v1655 = vld [vmem:[%s2 + $0x1f8] sm:$0xff]
  %v1656 = vld [vmem:[%s2 + $0x200] sm:$0xff]
  %v1657 = vld [vmem:[%s2 + $0x208] sm:$0xff]
  %v1658 = vld [vmem:[%s2 + $0x210] sm:$0xff]
  %v1659 = vld [vmem:[%s2 + $0x218] sm:$0xff]
  %v1660 = vld [vmem:[%s2 + $0x220] sm:$0xff]
  %v1661 = vld [vmem:[%s2 + $0x228] sm:$0xff]
  %v1662 = vld [vmem:[%s2 + $0x230] sm:$0xff]
  %v1663 = vld [vmem:[%s2 + $0x238] sm:$0xff]
  %v1664 = vld [vmem:[%s2 + $0x240] sm:$0xff]
  %v1665 = vld [vmem:[%s2 + $0x248] sm:$0xff]
  %v1666 = vld [vmem:[%s2 + $0x250] sm:$0xff]
  %v1667 = vld [vmem:[%s2 + $0x258] sm:$0xff]
  %v1668 = vld [vmem:[%s2 + $0x260] sm:$0xff]
  %v1669 = vld [vmem:[%s2 + $0x268] sm:$0xff]
  %v1670 = vld [vmem:[%s2 + $0x270] sm:$0xff]
  %v1671 = vld [vmem:[%s2 + $0x278] sm:$0xff]
  %v1672 = vld [vmem:[%s2 + $0x280] sm:$0xff]
  %v1673 = vld [vmem:[%s2 + $0x288] sm:$0xff]
  %v1674 = vld [vmem:[%s2 + $0x290] sm:$0xff]
  %v1675 = vld [vmem:[%s2 + $0x298] sm:$0xff]
  %v1676 = vld [vmem:[%s2 + $0x2a0] sm:$0xff]
  %v1677 = vld [vmem:[%s2 + $0x2a8] sm:$0xff]
  %v1678 = vld [vmem:[%s2 + $0x2b0] sm:$0xff]
  %v1679 = vld [vmem:[%s2 + $0x2b8] sm:$0xff]
  %v1680 = vld [vmem:[%s2 + $0x2c0] sm:$0xff]
  %v1681 = vld [vmem:[%s2 + $0x2c8] sm:$0xff]
  %v1682 = vld [vmem:[%s2 + $0x2d0] sm:$0xff]
  %v1683 = vld [vmem:[%s2 + $0x2d8] sm:$0xff]
  %v1684 = vld [vmem:[%s2 + $0x2e0] sm:$0xff]
  %v1685 = vld [vmem:[%s2 + $0x2e8] sm:$0xff]
  %v1686 = vld [vmem:[%s2 + $0x2f0] sm:$0xff]
  %v1687 = vld [vmem:[%s2 + $0x2f8] sm:$0xff]
  %v1688 = vld [vmem:[%s2 + $0x300] sm:$0xff]
  %v1689 = vld [vmem:[%s2 + $0x308] sm:$0xff]
  %v1690 = vld [vmem:[%s2 + $0x310] sm:$0xff]
  %v1691 = vld [vmem:[%s2 + $0x318] sm:$0xff]
  %v1692 = vld [vmem:[%s2 + $0x320] sm:$0xff]
  %v1693 = vld [vmem:[%s2 + $0x328] sm:$0xff]
  %v1694 = vld [vmem:[%s2 + $0x330] sm:$0xff]
  %v1695 = vld [vmem:[%s2 + $0x338] sm:$0xff]
  %v1696 = vld [vmem:[%s2 + $0x340] sm:$0xff]
  %v1697 = vld [vmem:[%s2 + $0x348] sm:$0xff]
  %v1698 = vld [vmem:[%s2 + $0x350] sm:$0xff]
  %v1699 = vld [vmem:[%s2 + $0x358] sm:$0xff]
  %v1700 = vld [vmem:[%s2 + $0x360] sm:$0xff]
  %v1701 = vld [vmem:[%s2 + $0x368] sm:$0xff]
  %v1702 = vld [vmem:[%s2 + $0x370] sm:$0xff]
  %v1703 = vld [vmem:[%s2 + $0x378] sm:$0xff]
  %v1704 = vld [vmem:[%s2 + $0x380] sm:$0xff]
  %v1705 = vld [vmem:[%s2 + $0x388] sm:$0xff]
  %v1706 = vld [vmem:[%s2 + $0x390] sm:$0xff]
  %v1707 = vld [vmem:[%s2 + $0x398] sm:$0xff]
  %v1708 = vld [vmem:[%s2 + $0x3a0] sm:$0xff]
  %v1709 = vld [vmem:[%s2 + $0x3a8] sm:$0xff]
  %v1710 = vld [vmem:[%s2 + $0x3b0] sm:$0xff]
  %v1711 = vld [vmem:[%s2 + $0x3b8] sm:$0xff]
  %v1712 = vld [vmem:[%s2 + $0x3c0] sm:$0xff]
  %v1713 = vld [vmem:[%s2 + $0x3c8] sm:$0xff]
  %v1714 = vld [vmem:[%s2 + $0x3d0] sm:$0xff]
  %v1715 = vld [vmem:[%s2 + $0x3d8] sm:$0xff]
  %v1716 = vld [vmem:[%s2 + $0x3e0] sm:$0xff]
  %v1717 = vld [vmem:[%s2 + $0x3e8] sm:$0xff]
  %v1718 = vld [vmem:[%s2 + $0x3f0] sm:$0xff]
  %v1719 = vld [vmem:[%s2 + $0x3f8] sm:$0xff]
  %v1720 = vld [vmem:[%s2 + $0x400] sm:$0xff]
  %v1721 = vld [vmem:[%s2 + $0x408] sm:$0xff]
  %v1722 = vld [vmem:[%s2 + $0x410] sm:$0xff]
  %v1723 = vld [vmem:[%s2 + $0x418] sm:$0xff]
  %v1724 = vld [vmem:[%s2 + $0x420] sm:$0xff]
  %v1725 = vld [vmem:[%s2 + $0x428] sm:$0xff]
  %v1726 = vld [vmem:[%s2 + $0x430] sm:$0xff]
  %v1727 = vld [vmem:[%s2 + $0x438] sm:$0xff]
  %v1728 = vld [vmem:[%s2 + $0x440] sm:$0xff]
  %v1729 = vld [vmem:[%s2 + $0x448] sm:$0xff]
  %v1730 = vld [vmem:[%s2 + $0x450] sm:$0xff]
  %v1731 = vld [vmem:[%s2 + $0x458] sm:$0xff]
  %v1732 = vld [vmem:[%s2 + $0x460] sm:$0xff]
  %v1733 = vld [vmem:[%s2 + $0x468] sm:$0xff]
  %v1734 = vld [vmem:[%s2 + $0x470] sm:$0xff]
  %v1735 = vld [vmem:[%s2 + $0x478] sm:$0xff]
  %v1736 = vld [vmem:[%s2 + $0x480] sm:$0xff]
  %v1737 = vld [vmem:[%s2 + $0x488] sm:$0xff]
  %v1738 = vld [vmem:[%s2 + $0x490] sm:$0xff]
  %v1739 = vld [vmem:[%s2 + $0x498] sm:$0xff]
  %v1740 = vld [vmem:[%s2 + $0x4a0] sm:$0xff]
  %v1741 = vld [vmem:[%s2 + $0x4a8] sm:$0xff]
  %v1742 = vld [vmem:[%s2 + $0x4b0] sm:$0xff]
  %v1743 = vld [vmem:[%s2 + $0x4b8] sm:$0xff]
  %v1744 = vld [vmem:[%s2 + $0x4c0] sm:$0xff]
  %v1745 = vld [vmem:[%s2 + $0x4c8] sm:$0xff]
  %v1746 = vld [vmem:[%s2 + $0x4d0] sm:$0xff]
  %v1747 = vld [vmem:[%s2 + $0x4d8] sm:$0xff]
  %v1748 = vld [vmem:[%s2 + $0x4e0] sm:$0xff]
  %v1749 = vld [vmem:[%s2 + $0x4e8] sm:$0xff]
  %v1750 = vld [vmem:[%s2 + $0x4f0] sm:$0xff]
  %v1751 = vld [vmem:[%s2 + $0x4f8] sm:$0xff]
  %v1752 = vld [vmem:[%s2 + $0x500] sm:$0xff]
  %v1753 = vld [vmem:[%s2 + $0x508] sm:$0xff]
  %v1754 = vld [vmem:[%s2 + $0x510] sm:$0xff]
  %v1755 = vld [vmem:[%s2 + $0x518] sm:$0xff]
  %v1756 = vld [vmem:[%s2 + $0x520] sm:$0xff]
  %v1757 = vld [vmem:[%s2 + $0x528] sm:$0xff]
  %v1758 = vld [vmem:[%s2 + $0x530] sm:$0xff]
  %v1759 = vld [vmem:[%s2 + $0x538] sm:$0xff]
  %v1760 = vld [vmem:[%s2 + $0x540] sm:$0xff]
  %v1761 = vld [vmem:[%s2 + $0x548] sm:$0xff]
  %v1762 = vld [vmem:[%s2 + $0x550] sm:$0xff]
  %v1763 = vld [vmem:[%s2 + $0x558] sm:$0xff]
  %v1764 = vld [vmem:[%s2 + $0x560] sm:$0xff]
  %v1765 = vld [vmem:[%s2 + $0x568] sm:$0xff]
  %v1766 = vld [vmem:[%s2 + $0x570] sm:$0xff]
  %v1767 = vld [vmem:[%s2 + $0x578] sm:$0xff]
  %v1768 = vld [vmem:[%s2 + $0x580] sm:$0xff]
  %v1769 = vld [vmem:[%s2 + $0x588] sm:$0xff]
  %v1770 = vld [vmem:[%s2 + $0x590] sm:$0xff]
  %v1771 = vld [vmem:[%s2 + $0x598] sm:$0xff]
  %v1772 = vld [vmem:[%s2 + $0x5a0] sm:$0xff]
  %v1773 = vld [vmem:[%s2 + $0x5a8] sm:$0xff]
  %v1774 = vld [vmem:[%s2 + $0x5b0] sm:$0xff]
  %v1775 = vld [vmem:[%s2 + $0x5b8] sm:$0xff]
  %v1776 = vld [vmem:[%s2 + $0x5c0] sm:$0xff]
  %v1777 = vld [vmem:[%s2 + $0x5c8] sm:$0xff]
  %v1778 = vld [vmem:[%s2 + $0x5d0] sm:$0xff]
  %v1779 = vld [vmem:[%s2 + $0x5d8] sm:$0xff]
  %v1780 = vld [vmem:[%s2 + $0x5e0] sm:$0xff]
  %v1781 = vld [vmem:[%s2 + $0x5e8] sm:$0xff]
  %v1782 = vld [vmem:[%s2 + $0x5f0] sm:$0xff]
  %v1783 = vld [vmem:[%s2 + $0x5f8] sm:$0xff]
  %v1784 = vld [vmem:[%s2 + $0x600] sm:$0xff]
  %v1785 = vld [vmem:[%s2 + $0x608] sm:$0xff]
  %v1786 = vld [vmem:[%s2 + $0x610] sm:$0xff]
  %v1787 = vld [vmem:[%s2 + $0x618] sm:$0xff]
  %v1984 = vunpack.c.l.b16 %v1592
  %v1985 = vunpack.c.h.b16 %v1592
  %v1986 = vunpack.c.l.b16 %v1593
  %v1987 = vunpack.c.h.b16 %v1593
  %v1988 = vunpack.c.l.b16 %v1594
  %v1989 = vunpack.c.h.b16 %v1594
  %v1990 = vunpack.c.l.b16 %v1595
  %v1991 = vunpack.c.h.b16 %v1595
  %v1992 = vunpack.c.l.b16 %v1596
  %v1993 = vunpack.c.h.b16 %v1596
  %v1994 = vunpack.c.l.b16 %v1597
  %v1995 = vunpack.c.h.b16 %v1597
  %v1996 = vunpack.c.l.b16 %v1598
  %v1997 = vunpack.c.h.b16 %v1598
  %v1998 = vunpack.c.l.b16 %v1599
  %v1999 = vunpack.c.h.b16 %v1599
  %v2000 = vunpack.c.l.b16 %v1600
  %v2001 = vunpack.c.h.b16 %v1600
  %v2002 = vunpack.c.l.b16 %v1601
  %v2003 = vunpack.c.h.b16 %v1601
  %v2004 = vunpack.c.l.b16 %v1602
  %v2005 = vunpack.c.h.b16 %v1602
  %v2006 = vunpack.c.l.b16 %v1603
  %v2007 = vunpack.c.h.b16 %v1603
  %v2008 = vunpack.c.l.b16 %v1604
  %v2009 = vunpack.c.h.b16 %v1604
  %v2010 = vunpack.c.l.b16 %v1605
  %v2011 = vunpack.c.h.b16 %v1605
  %v2012 = vunpack.c.l.b16 %v1606
  %v2013 = vunpack.c.h.b16 %v1606
  %v2014 = vunpack.c.l.b16 %v1607
  %v2015 = vunpack.c.h.b16 %v1607
  %v2016 = vunpack.c.l.b16 %v1608
  %v2017 = vunpack.c.h.b16 %v1608
  %v2018 = vunpack.c.l.b16 %v1609
  %v2019 = vunpack.c.h.b16 %v1609
  %v2020 = vunpack.c.l.b16 %v1610
  %v2021 = vunpack.c.h.b16 %v1610
  %v2022 = vunpack.c.l.b16 %v1611
  %v2023 = vunpack.c.h.b16 %v1611
  %v2024 = vunpack.c.l.b16 %v1612
  %v2025 = vunpack.c.h.b16 %v1612
  %v2026 = vunpack.c.l.b16 %v1613
  %v2027 = vunpack.c.h.b16 %v1613
  %v2028 = vunpack.c.l.b16 %v1614
  %v2029 = vunpack.c.h.b16 %v1614
  %v2030 = vunpack.c.l.b16 %v1615
  %v2031 = vunpack.c.h.b16 %v1615
  %v2032 = vunpack.c.l.b16 %v1616
  %v2033 = vunpack.c.h.b16 %v1616
  %v2034 = vunpack.c.l.b16 %v1617
  %v2035 = vunpack.c.h.b16 %v1617
  %v2036 = vunpack.c.l.b16 %v1618
  %v2037 = vunpack.c.h.b16 %v1618
  %v2038 = vunpack.c.l.b16 %v1619
  %v2039 = vunpack.c.h.b16 %v1619
  %v2040 = vunpack.c.l.b16 %v1620
  %v2041 = vunpack.c.h.b16 %v1620
  %v2042 = vunpack.c.l.b16 %v1621
  %v2043 = vunpack.c.h.b16 %v1621
  %v2044 = vunpack.c.l.b16 %v1622
  %v2045 = vunpack.c.h.b16 %v1622
  %v2046 = vunpack.c.l.b16 %v1623
  %v2047 = vunpack.c.h.b16 %v1623
  %v2048 = vunpack.c.l.b16 %v1624
  %v2049 = vunpack.c.h.b16 %v1624
  %v2050 = vunpack.c.l.b16 %v1625
  %v2051 = vunpack.c.h.b16 %v1625
  %v2052 = vunpack.c.l.b16 %v1626
  %v2053 = vunpack.c.h.b16 %v1626
  %v2054 = vunpack.c.l.b16 %v1627
  %v2055 = vunpack.c.h.b16 %v1627
  %v2056 = vunpack.c.l.b16 %v1628
  %v2057 = vunpack.c.h.b16 %v1628
  %v2058 = vunpack.c.l.b16 %v1629
  %v2059 = vunpack.c.h.b16 %v1629
  %v2060 = vunpack.c.l.b16 %v1630
  %v2061 = vunpack.c.h.b16 %v1630
  %v2062 = vunpack.c.l.b16 %v1631
  %v2063 = vunpack.c.h.b16 %v1631
  %v2064 = vunpack.c.l.b16 %v1632
  %v2065 = vunpack.c.h.b16 %v1632
  %v2066 = vunpack.c.l.b16 %v1633
  %v2067 = vunpack.c.h.b16 %v1633
  %v2068 = vunpack.c.l.b16 %v1634
  %v2069 = vunpack.c.h.b16 %v1634
  %v2070 = vunpack.c.l.b16 %v1635
  %v2071 = vunpack.c.h.b16 %v1635
  %v2072 = vunpack.c.l.b16 %v1636
  %v2073 = vunpack.c.h.b16 %v1636
  %v2074 = vunpack.c.l.b16 %v1637
  %v2075 = vunpack.c.h.b16 %v1637
  %v2076 = vunpack.c.l.b16 %v1638
  %v2077 = vunpack.c.h.b16 %v1638
  %v2078 = vunpack.c.l.b16 %v1639
  %v2079 = vunpack.c.h.b16 %v1639
  %v2080 = vunpack.c.l.b16 %v1640
  %v2081 = vunpack.c.h.b16 %v1640
  %v2082 = vunpack.c.l.b16 %v1641
  %v2083 = vunpack.c.h.b16 %v1641
  %v2084 = vunpack.c.l.b16 %v1642
  %v2085 = vunpack.c.h.b16 %v1642
  %v2086 = vunpack.c.l.b16 %v1643
  %v2087 = vunpack.c.h.b16 %v1643
  %v2088 = vunpack.c.l.b16 %v1644
  %v2089 = vunpack.c.h.b16 %v1644
  %v2090 = vunpack.c.l.b16 %v1645
  %v2091 = vunpack.c.h.b16 %v1645
  %v2092 = vunpack.c.l.b16 %v1646
  %v2093 = vunpack.c.h.b16 %v1646
  %v2094 = vunpack.c.l.b16 %v1647
  %v2095 = vunpack.c.h.b16 %v1647
  %v2096 = vunpack.c.l.b16 %v1648
  %v2097 = vunpack.c.h.b16 %v1648
  %v2098 = vunpack.c.l.b16 %v1649
  %v2099 = vunpack.c.h.b16 %v1649
  %v2100 = vunpack.c.l.b16 %v1650
  %v2101 = vunpack.c.h.b16 %v1650
  %v2102 = vunpack.c.l.b16 %v1651
  %v2103 = vunpack.c.h.b16 %v1651
  %v2104 = vunpack.c.l.b16 %v1652
  %v2105 = vunpack.c.h.b16 %v1652
  %v2106 = vunpack.c.l.b16 %v1653
  %v2107 = vunpack.c.h.b16 %v1653
  %v2108 = vunpack.c.l.b16 %v1654
  %v2109 = vunpack.c.h.b16 %v1654
  %v2110 = vunpack.c.l.b16 %v1655
  %v2111 = vunpack.c.h.b16 %v1655
  %v2112 = vunpack.c.l.b16 %v1656
  %v2113 = vunpack.c.h.b16 %v1656
  %v2114 = vunpack.c.l.b16 %v1657
  %v2115 = vunpack.c.h.b16 %v1657
  %v2116 = vunpack.c.l.b16 %v1658
  %v2117 = vunpack.c.h.b16 %v1658
  %v2118 = vunpack.c.l.b16 %v1659
  %v2119 = vunpack.c.h.b16 %v1659
  %v2120 = vunpack.c.l.b16 %v1660
  %v2121 = vunpack.c.h.b16 %v1660
  %v2122 = vunpack.c.l.b16 %v1661
  %v2123 = vunpack.c.h.b16 %v1661
  %v2124 = vunpack.c.l.b16 %v1662
  %v2125 = vunpack.c.h.b16 %v1662
  %v2126 = vunpack.c.l.b16 %v1663
  %v2127 = vunpack.c.h.b16 %v1663
  %v2128 = vunpack.c.l.b16 %v1664
  %v2129 = vunpack.c.h.b16 %v1664
  %v2130 = vunpack.c.l.b16 %v1665
  %v2131 = vunpack.c.h.b16 %v1665
  %v2132 = vunpack.c.l.b16 %v1666
  %v2133 = vunpack.c.h.b16 %v1666
  %v2134 = vunpack.c.l.b16 %v1667
  %v2135 = vunpack.c.h.b16 %v1667
  %v2136 = vunpack.c.l.b16 %v1668
  %v2137 = vunpack.c.h.b16 %v1668
  %v2138 = vunpack.c.l.b16 %v1669
  %v2139 = vunpack.c.h.b16 %v1669
  %v2140 = vunpack.c.l.b16 %v1670
  %v2141 = vunpack.c.h.b16 %v1670
  %v2142 = vunpack.c.l.b16 %v1671
  %v2143 = vunpack.c.h.b16 %v1671
  %v2144 = vunpack.c.l.b16 %v1672
  %v2145 = vunpack.c.h.b16 %v1672
  %v2146 = vunpack.c.l.b16 %v1673
  %v2147 = vunpack.c.h.b16 %v1673
  %v2148 = vunpack.c.l.b16 %v1674
  %v2149 = vunpack.c.h.b16 %v1674
  %v2150 = vunpack.c.l.b16 %v1675
  %v2151 = vunpack.c.h.b16 %v1675
  %v2152 = vunpack.c.l.b16 %v1676
  %v2153 = vunpack.c.h.b16 %v1676
  %v2154 = vunpack.c.l.b16 %v1677
  %v2155 = vunpack.c.h.b16 %v1677
  %v2156 = vunpack.c.l.b16 %v1678
  %v2157 = vunpack.c.h.b16 %v1678
  %v2158 = vunpack.c.l.b16 %v1679
  %v2159 = vunpack.c.h.b16 %v1679
  %v2160 = vunpack.c.l.b16 %v1680
  %v2161 = vunpack.c.h.b16 %v1680
  %v2162 = vunpack.c.l.b16 %v1681
  %v2163 = vunpack.c.h.b16 %v1681
  %v2164 = vunpack.c.l.b16 %v1682
  %v2165 = vunpack.c.h.b16 %v1682
  %v2166 = vunpack.c.l.b16 %v1683
  %v2167 = vunpack.c.h.b16 %v1683
  %v2168 = vunpack.c.l.b16 %v1684
  %v2169 = vunpack.c.h.b16 %v1684
  %v2170 = vunpack.c.l.b16 %v1685
  %v2171 = vunpack.c.h.b16 %v1685
  %v2172 = vunpack.c.l.b16 %v1686
  %v2173 = vunpack.c.h.b16 %v1686
  %v2174 = vunpack.c.l.b16 %v1687
  %v2175 = vunpack.c.h.b16 %v1687
  %v2176 = vunpack.c.l.b16 %v1688
  %v2177 = vunpack.c.h.b16 %v1688
  %v2178 = vunpack.c.l.b16 %v1689
  %v2179 = vunpack.c.h.b16 %v1689
  %v2180 = vunpack.c.l.b16 %v1690
  %v2181 = vunpack.c.h.b16 %v1690
  %v2182 = vunpack.c.l.b16 %v1691
  %v2183 = vunpack.c.h.b16 %v1691
  %v2184 = vunpack.c.l.b16 %v1692
  %v2185 = vunpack.c.h.b16 %v1692
  %v2186 = vunpack.c.l.b16 %v1693
  %v2187 = vunpack.c.h.b16 %v1693
  %v2188 = vunpack.c.l.b16 %v1694
  %v2189 = vunpack.c.h.b16 %v1694
  %v2190 = vunpack.c.l.b16 %v1695
  %v2191 = vunpack.c.h.b16 %v1695
  %v2192 = vunpack.c.l.b16 %v1696
  %v2193 = vunpack.c.h.b16 %v1696
  %v2194 = vunpack.c.l.b16 %v1697
  %v2195 = vunpack.c.h.b16 %v1697
  %v2196 = vunpack.c.l.b16 %v1698
  %v2197 = vunpack.c.h.b16 %v1698
  %v2198 = vunpack.c.l.b16 %v1699
  %v2199 = vunpack.c.h.b16 %v1699
  %v2200 = vunpack.c.l.b16 %v1700
  %v2201 = vunpack.c.h.b16 %v1700
  %v2202 = vunpack.c.l.b16 %v1701
  %v2203 = vunpack.c.h.b16 %v1701
  %v2204 = vunpack.c.l.b16 %v1702
  %v2205 = vunpack.c.h.b16 %v1702
  %v2206 = vunpack.c.l.b16 %v1703
  %v2207 = vunpack.c.h.b16 %v1703
  %v2208 = vunpack.c.l.b16 %v1704
  %v2209 = vunpack.c.h.b16 %v1704
  %v2210 = vunpack.c.l.b16 %v1705
  %v2211 = vunpack.c.h.b16 %v1705
  %v2212 = vunpack.c.l.b16 %v1706
  %v2213 = vunpack.c.h.b16 %v1706
  %v2214 = vunpack.c.l.b16 %v1707
  %v2215 = vunpack.c.h.b16 %v1707
  %v2216 = vunpack.c.l.b16 %v1708
  %v2217 = vunpack.c.h.b16 %v1708
  %v2218 = vunpack.c.l.b16 %v1709
  %v2219 = vunpack.c.h.b16 %v1709
  %v2220 = vunpack.c.l.b16 %v1710
  %v2221 = vunpack.c.h.b16 %v1710
  %v2222 = vunpack.c.l.b16 %v1711
  %v2223 = vunpack.c.h.b16 %v1711
  %v2224 = vunpack.c.l.b16 %v1712
  %v2225 = vunpack.c.h.b16 %v1712
  %v2226 = vunpack.c.l.b16 %v1713
  %v2227 = vunpack.c.h.b16 %v1713
  %v2228 = vunpack.c.l.b16 %v1714
  %v2229 = vunpack.c.h.b16 %v1714
  %v2230 = vunpack.c.l.b16 %v1715
  %v2231 = vunpack.c.h.b16 %v1715
  %v2232 = vunpack.c.l.b16 %v1716
  %v2233 = vunpack.c.h.b16 %v1716
  %v2234 = vunpack.c.l.b16 %v1717
  %v2235 = vunpack.c.h.b16 %v1717
  %v2236 = vunpack.c.l.b16 %v1718
  %v2237 = vunpack.c.h.b16 %v1718
  %v2238 = vunpack.c.l.b16 %v1719
  %v2239 = vunpack.c.h.b16 %v1719
  %v2240 = vunpack.c.l.b16 %v1720
  %v2241 = vunpack.c.h.b16 %v1720
  %v2242 = vunpack.c.l.b16 %v1721
  %v2243 = vunpack.c.h.b16 %v1721
  %v2244 = vunpack.c.l.b16 %v1722
  %v2245 = vunpack.c.h.b16 %v1722
  %v2246 = vunpack.c.l.b16 %v1723
  %v2247 = vunpack.c.h.b16 %v1723
  %v2248 = vunpack.c.l.b16 %v1724
  %v2249 = vunpack.c.h.b16 %v1724
  %v2250 = vunpack.c.l.b16 %v1725
  %v2251 = vunpack.c.h.b16 %v1725
  %v2252 = vunpack.c.l.b16 %v1726
  %v2253 = vunpack.c.h.b16 %v1726
  %v2254 = vunpack.c.l.b16 %v1727
  %v2255 = vunpack.c.h.b16 %v1727
  %v2256 = vunpack.c.l.b16 %v1728
  %v2257 = vunpack.c.h.b16 %v1728
  %v2258 = vunpack.c.l.b16 %v1729
  %v2259 = vunpack.c.h.b16 %v1729
  %v2260 = vunpack.c.l.b16 %v1730
  %v2261 = vunpack.c.h.b16 %v1730
  %v2262 = vunpack.c.l.b16 %v1731
  %v2263 = vunpack.c.h.b16 %v1731
  %v2264 = vunpack.c.l.b16 %v1732
  %v2265 = vunpack.c.h.b16 %v1732
  %v2266 = vunpack.c.l.b16 %v1733
  %v2267 = vunpack.c.h.b16 %v1733
  %v2268 = vunpack.c.l.b16 %v1734
  %v2269 = vunpack.c.h.b16 %v1734
  %v2270 = vunpack.c.l.b16 %v1735
  %v2271 = vunpack.c.h.b16 %v1735
  %v2272 = vunpack.c.l.b16 %v1736
  %v2273 = vunpack.c.h.b16 %v1736
  %v2274 = vunpack.c.l.b16 %v1737
  %v2275 = vunpack.c.h.b16 %v1737
  %v2276 = vunpack.c.l.b16 %v1738
  %v2277 = vunpack.c.h.b16 %v1738
  %v2278 = vunpack.c.l.b16 %v1739
  %v2279 = vunpack.c.h.b16 %v1739
  %v2280 = vunpack.c.l.b16 %v1740
  %v2281 = vunpack.c.h.b16 %v1740
  %v2282 = vunpack.c.l.b16 %v1741
  %v2283 = vunpack.c.h.b16 %v1741
  %v2284 = vunpack.c.l.b16 %v1742
  %v2285 = vunpack.c.h.b16 %v1742
  %v2286 = vunpack.c.l.b16 %v1743
  %v2287 = vunpack.c.h.b16 %v1743
  %v2288 = vunpack.c.l.b16 %v1744
  %v2289 = vunpack.c.h.b16 %v1744
  %v2290 = vunpack.c.l.b16 %v1745
  %v2291 = vunpack.c.h.b16 %v1745
  %v2292 = vunpack.c.l.b16 %v1746
  %v2293 = vunpack.c.h.b16 %v1746
  %v2294 = vunpack.c.l.b16 %v1747
  %v2295 = vunpack.c.h.b16 %v1747
  %v2296 = vunpack.c.l.b16 %v1748
  %v2297 = vunpack.c.h.b16 %v1748
  %v2298 = vunpack.c.l.b16 %v1749
  %v2299 = vunpack.c.h.b16 %v1749
  %v2300 = vunpack.c.l.b16 %v1750
  %v2301 = vunpack.c.h.b16 %v1750
  %v2302 = vunpack.c.l.b16 %v1751
  %v2303 = vunpack.c.h.b16 %v1751
  %v2304 = vunpack.c.l.b16 %v1752
  %v2305 = vunpack.c.h.b16 %v1752
  %v2306 = vunpack.c.l.b16 %v1753
  %v2307 = vunpack.c.h.b16 %v1753
  %v2308 = vunpack.c.l.b16 %v1754
  %v2309 = vunpack.c.h.b16 %v1754
  %v2310 = vunpack.c.l.b16 %v1755
  %v2311 = vunpack.c.h.b16 %v1755
  %v2312 = vunpack.c.l.b16 %v1756
  %v2313 = vunpack.c.h.b16 %v1756
  %v2314 = vunpack.c.l.b16 %v1757
  %v2315 = vunpack.c.h.b16 %v1757
  %v2316 = vunpack.c.l.b16 %v1758
  %v2317 = vunpack.c.h.b16 %v1758
  %v2318 = vunpack.c.l.b16 %v1759
  %v2319 = vunpack.c.h.b16 %v1759
  %v2320 = vunpack.c.l.b16 %v1760
  %v2321 = vunpack.c.h.b16 %v1760
  %v2322 = vunpack.c.l.b16 %v1761
  %v2323 = vunpack.c.h.b16 %v1761
  %v2324 = vunpack.c.l.b16 %v1762
  %v2325 = vunpack.c.h.b16 %v1762
  %v2326 = vunpack.c.l.b16 %v1763
  %v2327 = vunpack.c.h.b16 %v1763
  %v2328 = vunpack.c.l.b16 %v1764
  %v2329 = vunpack.c.h.b16 %v1764
  %v2330 = vunpack.c.l.b16 %v1765
  %v2331 = vunpack.c.h.b16 %v1765
  %v2332 = vunpack.c.l.b16 %v1766
  %v2333 = vunpack.c.h.b16 %v1766
  %v2334 = vunpack.c.l.b16 %v1767
  %v2335 = vunpack.c.h.b16 %v1767
  %v2336 = vunpack.c.l.b16 %v1768
  %v2337 = vunpack.c.h.b16 %v1768
  %v2338 = vunpack.c.l.b16 %v1769
  %v2339 = vunpack.c.h.b16 %v1769
  %v2340 = vunpack.c.l.b16 %v1770
  %v2341 = vunpack.c.h.b16 %v1770
  %v2342 = vunpack.c.l.b16 %v1771
  %v2343 = vunpack.c.h.b16 %v1771
  %v2344 = vunpack.c.l.b16 %v1772
  %v2345 = vunpack.c.h.b16 %v1772
  %v2346 = vunpack.c.l.b16 %v1773
  %v2347 = vunpack.c.h.b16 %v1773
  %v2348 = vunpack.c.l.b16 %v1774
  %v2349 = vunpack.c.h.b16 %v1774
  %v2350 = vunpack.c.l.b16 %v1775
  %v2351 = vunpack.c.h.b16 %v1775
  %v2352 = vunpack.c.l.b16 %v1776
  %v2353 = vunpack.c.h.b16 %v1776
  %v2354 = vunpack.c.l.b16 %v1777
  %v2355 = vunpack.c.h.b16 %v1777
  %v2356 = vunpack.c.l.b16 %v1778
  %v2357 = vunpack.c.h.b16 %v1778
  %v2358 = vunpack.c.l.b16 %v1779
  %v2359 = vunpack.c.h.b16 %v1779
  %v2360 = vunpack.c.l.b16 %v1780
  %v2361 = vunpack.c.h.b16 %v1780
  %v2362 = vunpack.c.l.b16 %v1781
  %v2363 = vunpack.c.h.b16 %v1781
  %v2364 = vunpack.c.l.b16 %v1782
  %v2365 = vunpack.c.h.b16 %v1782
  %v2366 = vunpack.c.l.b16 %v1783
  %v2367 = vunpack.c.h.b16 %v1783
  %v2368 = vunpack.c.l.b16 %v1784
  %v2369 = vunpack.c.h.b16 %v1784
  %v2370 = vunpack.c.l.b16 %v1785
  %v2371 = vunpack.c.h.b16 %v1785
  %v2372 = vunpack.c.l.b16 %v1786
  %v2373 = vunpack.c.h.b16 %v1786
  %v2374 = vunpack.c.l.b16 %v1787
  %v2375 = vunpack.c.h.b16 %v1787
  %v2376 = vpack.c.b16 %v1988, %v1984
  %v2377 = vpack.c.b16 %v1989, %v1985
  %v2378 = vpack.c.b16 %v1990, %v1986
  %v2379 = vpack.c.b16 %v1991, %v1987
  %v2380 = vpack.c.b16 %v1996, %v1992
  %v2381 = vpack.c.b16 %v1997, %v1993
  %v2382 = vpack.c.b16 %v1998, %v1994
  %v2383 = vpack.c.b16 %v1999, %v1995
  %v2384 = vpack.c.b16 %v2004, %v2000
  %v2385 = vpack.c.b16 %v2005, %v2001
  %v2386 = vpack.c.b16 %v2006, %v2002
  %v2387 = vpack.c.b16 %v2007, %v2003
  %v2388 = vpack.c.b16 %v2012, %v2008
  %v2389 = vpack.c.b16 %v2013, %v2009
  %v2390 = vpack.c.b16 %v2014, %v2010
  %v2391 = vpack.c.b16 %v2015, %v2011
  %v2392 = vpack.c.b16 %v2020, %v2016
  %v2393 = vpack.c.b16 %v2021, %v2017
  %v2394 = vpack.c.b16 %v2022, %v2018
  %v2395 = vpack.c.b16 %v2023, %v2019
  %v2396 = vpack.c.b16 %v2028, %v2024
  %v2397 = vpack.c.b16 %v2029, %v2025
  %v2398 = vpack.c.b16 %v2030, %v2026
  %v2399 = vpack.c.b16 %v2031, %v2027
  %v2400 = vpack.c.b16 %v2036, %v2032
  %v2401 = vpack.c.b16 %v2037, %v2033
  %v2402 = vpack.c.b16 %v2038, %v2034
  %v2403 = vpack.c.b16 %v2039, %v2035
  %v2404 = vpack.c.b16 %v2044, %v2040
  %v2405 = vpack.c.b16 %v2045, %v2041
  %v2406 = vpack.c.b16 %v2046, %v2042
  %v2407 = vpack.c.b16 %v2047, %v2043
  %v2408 = vpack.c.b16 %v2052, %v2048
  %v2409 = vpack.c.b16 %v2053, %v2049
  %v2410 = vpack.c.b16 %v2054, %v2050
  %v2411 = vpack.c.b16 %v2055, %v2051
  %v2412 = vpack.c.b16 %v2060, %v2056
  %v2413 = vpack.c.b16 %v2061, %v2057
  %v2414 = vpack.c.b16 %v2062, %v2058
  %v2415 = vpack.c.b16 %v2063, %v2059
  %v2416 = vpack.c.b16 %v2068, %v2064
  %v2417 = vpack.c.b16 %v2069, %v2065
  %v2418 = vpack.c.b16 %v2070, %v2066
  %v2419 = vpack.c.b16 %v2071, %v2067
  %v2420 = vpack.c.b16 %v2076, %v2072
  %v2421 = vpack.c.b16 %v2077, %v2073
  %v2422 = vpack.c.b16 %v2078, %v2074
  %v2423 = vpack.c.b16 %v2079, %v2075
  %v2424 = vpack.c.b16 %v2084, %v2080
  %v2425 = vpack.c.b16 %v2085, %v2081
  %v2426 = vpack.c.b16 %v2086, %v2082
  %v2427 = vpack.c.b16 %v2087, %v2083
  %v2428 = vpack.c.b16 %v2092, %v2088
  %v2429 = vpack.c.b16 %v2093, %v2089
  %v2430 = vpack.c.b16 %v2094, %v2090
  %v2431 = vpack.c.b16 %v2095, %v2091
  %v2432 = vpack.c.b16 %v2100, %v2096
  %v2433 = vpack.c.b16 %v2101, %v2097
  %v2434 = vpack.c.b16 %v2102, %v2098
  %v2435 = vpack.c.b16 %v2103, %v2099
  %v2436 = vpack.c.b16 %v2108, %v2104
  %v2437 = vpack.c.b16 %v2109, %v2105
  %v2438 = vpack.c.b16 %v2110, %v2106
  %v2439 = vpack.c.b16 %v2111, %v2107
  %v2440 = vpack.c.b16 %v2116, %v2112
  %v2441 = vpack.c.b16 %v2117, %v2113
  %v2442 = vpack.c.b16 %v2118, %v2114
  %v2443 = vpack.c.b16 %v2119, %v2115
  %v2444 = vpack.c.b16 %v2124, %v2120
  %v2445 = vpack.c.b16 %v2125, %v2121
  %v2446 = vpack.c.b16 %v2126, %v2122
  %v2447 = vpack.c.b16 %v2127, %v2123
  %v2448 = vpack.c.b16 %v2132, %v2128
  %v2449 = vpack.c.b16 %v2133, %v2129
  %v2450 = vpack.c.b16 %v2134, %v2130
  %v2451 = vpack.c.b16 %v2135, %v2131
  %v2452 = vpack.c.b16 %v2140, %v2136
  %v2453 = vpack.c.b16 %v2141, %v2137
  %v2454 = vpack.c.b16 %v2142, %v2138
  %v2455 = vpack.c.b16 %v2143, %v2139
  %v2456 = vpack.c.b16 %v2148, %v2144
  %v2457 = vpack.c.b16 %v2149, %v2145
  %v2458 = vpack.c.b16 %v2150, %v2146
  %v2459 = vpack.c.b16 %v2151, %v2147
  %v2460 = vpack.c.b16 %v2156, %v2152
  %v2461 = vpack.c.b16 %v2157, %v2153
  %v2462 = vpack.c.b16 %v2158, %v2154
  %v2463 = vpack.c.b16 %v2159, %v2155
  %v2464 = vpack.c.b16 %v2164, %v2160
  %v2465 = vpack.c.b16 %v2165, %v2161
  %v2466 = vpack.c.b16 %v2166, %v2162
  %v2467 = vpack.c.b16 %v2167, %v2163
  %v2468 = vpack.c.b16 %v2172, %v2168
  %v2469 = vpack.c.b16 %v2173, %v2169
  %v2470 = vpack.c.b16 %v2174, %v2170
  %v2471 = vpack.c.b16 %v2175, %v2171
  %v2472 = vpack.c.b16 %v2180, %v2176
  %v2473 = vpack.c.b16 %v2181, %v2177
  %v2474 = vpack.c.b16 %v2182, %v2178
  %v2475 = vpack.c.b16 %v2183, %v2179
  %v2476 = vpack.c.b16 %v2188, %v2184
  %v2477 = vpack.c.b16 %v2189, %v2185
  %v2478 = vpack.c.b16 %v2190, %v2186
  %v2479 = vpack.c.b16 %v2191, %v2187
  %v2480 = vpack.c.b16 %v2196, %v2192
  %v2481 = vpack.c.b16 %v2197, %v2193
  %v2482 = vpack.c.b16 %v2198, %v2194
  %v2483 = vpack.c.b16 %v2199, %v2195
  %v2484 = vpack.c.b16 %v2204, %v2200
  %v2485 = vpack.c.b16 %v2205, %v2201
  %v2486 = vpack.c.b16 %v2206, %v2202
  %v2487 = vpack.c.b16 %v2207, %v2203
  %v2488 = vpack.c.b16 %v2212, %v2208
  %v2489 = vpack.c.b16 %v2213, %v2209
  %v2490 = vpack.c.b16 %v2214, %v2210
  %v2491 = vpack.c.b16 %v2215, %v2211
  %v2492 = vpack.c.b16 %v2220, %v2216
  %v2493 = vpack.c.b16 %v2221, %v2217
  %v2494 = vpack.c.b16 %v2222, %v2218
  %v2495 = vpack.c.b16 %v2223, %v2219
  %v2496 = vpack.c.b16 %v2228, %v2224
  %v2497 = vpack.c.b16 %v2229, %v2225
  %v2498 = vpack.c.b16 %v2230, %v2226
  %v2499 = vpack.c.b16 %v2231, %v2227
  %v2500 = vpack.c.b16 %v2236, %v2232
  %v2501 = vpack.c.b16 %v2237, %v2233
  %v2502 = vpack.c.b16 %v2238, %v2234
  %v2503 = vpack.c.b16 %v2239, %v2235
  %v2504 = vpack.c.b16 %v2244, %v2240
  %v2505 = vpack.c.b16 %v2245, %v2241
  %v2506 = vpack.c.b16 %v2246, %v2242
  %v2507 = vpack.c.b16 %v2247, %v2243
  %v2508 = vpack.c.b16 %v2252, %v2248
  %v2509 = vpack.c.b16 %v2253, %v2249
  %v2510 = vpack.c.b16 %v2254, %v2250
  %v2511 = vpack.c.b16 %v2255, %v2251
  %v2512 = vpack.c.b16 %v2260, %v2256
  %v2513 = vpack.c.b16 %v2261, %v2257
  %v2514 = vpack.c.b16 %v2262, %v2258
  %v2515 = vpack.c.b16 %v2263, %v2259
  %v2516 = vpack.c.b16 %v2268, %v2264
  %v2517 = vpack.c.b16 %v2269, %v2265
  %v2518 = vpack.c.b16 %v2270, %v2266
  %v2519 = vpack.c.b16 %v2271, %v2267
  %v2520 = vpack.c.b16 %v2276, %v2272
  %v2521 = vpack.c.b16 %v2277, %v2273
  %v2522 = vpack.c.b16 %v2278, %v2274
  %v2523 = vpack.c.b16 %v2279, %v2275
  %v2524 = vpack.c.b16 %v2284, %v2280
  %v2525 = vpack.c.b16 %v2285, %v2281
  %v2526 = vpack.c.b16 %v2286, %v2282
  %v2527 = vpack.c.b16 %v2287, %v2283
  %v2528 = vpack.c.b16 %v2292, %v2288
  %v2529 = vpack.c.b16 %v2293, %v2289
  %v2530 = vpack.c.b16 %v2294, %v2290
  %v2531 = vpack.c.b16 %v2295, %v2291
  %v2532 = vpack.c.b16 %v2300, %v2296
  %v2533 = vpack.c.b16 %v2301, %v2297
  %v2534 = vpack.c.b16 %v2302, %v2298
  %v2535 = vpack.c.b16 %v2303, %v2299
  %v2536 = vpack.c.b16 %v2308, %v2304
  %v2537 = vpack.c.b16 %v2309, %v2305
  %v2538 = vpack.c.b16 %v2310, %v2306
  %v2539 = vpack.c.b16 %v2311, %v2307
  %v2540 = vpack.c.b16 %v2316, %v2312
  %v2541 = vpack.c.b16 %v2317, %v2313
  %v2542 = vpack.c.b16 %v2318, %v2314
  %v2543 = vpack.c.b16 %v2319, %v2315
  %v2544 = vpack.c.b16 %v2324, %v2320
  %v2545 = vpack.c.b16 %v2325, %v2321
  %v2546 = vpack.c.b16 %v2326, %v2322
  %v2547 = vpack.c.b16 %v2327, %v2323
  %v2548 = vpack.c.b16 %v2332, %v2328
  %v2549 = vpack.c.b16 %v2333, %v2329
  %v2550 = vpack.c.b16 %v2334, %v2330
  %v2551 = vpack.c.b16 %v2335, %v2331
  %v2552 = vpack.c.b16 %v2340, %v2336
  %v2553 = vpack.c.b16 %v2341, %v2337
  %v2554 = vpack.c.b16 %v2342, %v2338
  %v2555 = vpack.c.b16 %v2343, %v2339
  %v2556 = vpack.c.b16 %v2348, %v2344
  %v2557 = vpack.c.b16 %v2349, %v2345
  %v2558 = vpack.c.b16 %v2350, %v2346
  %v2559 = vpack.c.b16 %v2351, %v2347
  %v2560 = vpack.c.b16 %v2356, %v2352
  %v2561 = vpack.c.b16 %v2357, %v2353
  %v2562 = vpack.c.b16 %v2358, %v2354
  %v2563 = vpack.c.b16 %v2359, %v2355
  %v2564 = vpack.c.b16 %v2364, %v2360
  %v2565 = vpack.c.b16 %v2365, %v2361
  %v2566 = vpack.c.b16 %v2366, %v2362
  %v2567 = vpack.c.b16 %v2367, %v2363
  %v2568 = vpack.c.b16 %v2372, %v2368
  %v2569 = vpack.c.b16 %v2373, %v2369
  %v2570 = vpack.c.b16 %v2374, %v2370
  %v2571 = vpack.c.b16 %v2375, %v2371
  %2768 = vmatprep.subr.bf16.mxu0 %v2377
  %2769 = vmatpush1.bf16.msra.mxu0 %v2376
  %2770 = vmatprep.subr.bf16.mxu0 %v2381
  %2771 = vmatpush1.bf16.msra.mxu0 %v2380
  %2772 = vmatprep.subr.bf16.mxu0 %v2385
  %2773 = vmatpush1.bf16.msra.mxu0 %v2384
  %2774 = vmatprep.subr.bf16.mxu0 %v2389
  %2775 = vmatpush1.bf16.msra.mxu0 %v2388
  %2776 = vmatprep.subr.bf16.mxu0 %v2393
  %2777 = vmatpush1.bf16.msra.mxu0 %v2392
  %2778 = vmatprep.subr.bf16.mxu0 %v2397
  %2779 = vmatpush1.bf16.msra.mxu0 %v2396
  %2780 = vmatprep.subr.bf16.mxu0 %v2401
  %2781 = vmatpush1.bf16.msra.mxu0 %v2400
  %2782 = vmatprep.subr.bf16.mxu0 %v2405
  %2783 = vmatpush1.bf16.msra.mxu0 %v2404
  %2784 = vmatprep.subr.bf16.mxu0 %v2409
  %2785 = vmatpush1.bf16.msra.mxu0 %v2408
  %2786 = vmatprep.subr.bf16.mxu0 %v2413
  %2787 = vmatpush1.bf16.msra.mxu0 %v2412
  %2788 = vmatprep.subr.bf16.mxu0 %v2417
  %2789 = vmatpush1.bf16.msra.mxu0 %v2416
  %2790 = vmatprep.subr.bf16.mxu0 %v2421
  %2791 = vmatpush1.bf16.msra.mxu0 %v2420
  %2792 = vmatprep.subr.bf16.mxu0 %v2425
  %2793 = vmatpush1.bf16.msra.mxu0 %v2424
  %2794 = vmatprep.subr.bf16.mxu0 %v2429
  %2795 = vmatpush1.bf16.msra.mxu0 %v2428
  %2796 = vmatprep.subr.bf16.mxu0 %v2433
  %2797 = vmatpush1.bf16.msra.mxu0 %v2432
  %2798 = vmatprep.subr.bf16.mxu0 %v2437
  %2799 = vmatpush1.bf16.msra.mxu0 %v2436
  %2800 = vmatprep.mubr.bf16.mxu0 %v268
  %2801 = vmatmul.mubr.bf16.gmra.mrb[0].mxu0 %v267
  %v2802 = vpop.f32.mrb[0].mxu0
  %v2803 = vadd.f32 0.0, %v2802
  %v2804 = vpop.f32.mrb[0].mxu0
  %v2805 = vadd.f32 0.0, %v2804
  %v2806 = vpop.f32.mrb[0].mxu0
  %v2807 = vpop.f32.mrb[0].mxu0
  %2808 = vdwg.mxu0
  %2809 = vmatprep.subr.bf16.mxu0 %v2441
  %2810 = vmatpush1.bf16.msra.mxu0 %v2440
  %2811 = vmatprep.subr.bf16.mxu0 %v2445
  %2812 = vmatpush1.bf16.msra.mxu0 %v2444
  %2813 = vmatprep.subr.bf16.mxu0 %v2449
  %2814 = vmatpush1.bf16.msra.mxu0 %v2448
  %2815 = vmatprep.subr.bf16.mxu0 %v2453
  %2816 = vmatpush1.bf16.msra.mxu0 %v2452
  %2817 = vmatprep.subr.bf16.mxu0 %v2457
  %2818 = vmatpush1.bf16.msra.mxu0 %v2456
  %2819 = vmatprep.subr.bf16.mxu0 %v2461
  %2820 = vmatpush1.bf16.msra.mxu0 %v2460
  %2821 = vmatprep.subr.bf16.mxu0 %v2465
  %2822 = vmatpush1.bf16.msra.mxu0 %v2464
  %2823 = vmatprep.subr.bf16.mxu0 %v2469
  %2824 = vmatpush1.bf16.msra.mxu0 %v2468
  %2825 = vmatprep.subr.bf16.mxu0 %v2473
  %2826 = vmatpush1.bf16.msra.mxu0 %v2472
  %2827 = vmatprep.subr.bf16.mxu0 %v2477
  %2828 = vmatpush1.bf16.msra.mxu0 %v2476
  %2829 = vmatprep.subr.bf16.mxu0 %v2481
  %2830 = vmatpush1.bf16.msra.mxu0 %v2480
  %2831 = vmatprep.subr.bf16.mxu0 %v2485
  %2832 = vmatpush1.bf16.msra.mxu0 %v2484
  %2833 = vmatprep.subr.bf16.mxu0 %v2489
  %2834 = vmatpush1.bf16.msra.mxu0 %v2488
  %2835 = vmatprep.subr.bf16.mxu0 %v2493
  %2836 = vmatpush1.bf16.msra.mxu0 %v2492
  %2837 = vmatprep.subr.bf16.mxu0 %v2497
  %2838 = vmatpush1.bf16.msra.mxu0 %v2496
  %2839 = vmatprep.subr.bf16.mxu0 %v2501
  %2840 = vmatpush1.bf16.msra.mxu0 %v2500
  %2841 = vmatprep.mubr.bf16.mxu0 %v270
  %2842 = vmatmul.mubr.bf16.gmra.mrb[0].mxu0 %v269
  %v2843 = vpop.f32.mrb[0].mxu0
  %v2844 = vadd.f32 %v2803, %v2843
  %v2845 = vpop.f32.mrb[0].mxu0
  %v2846 = vadd.f32 %v2805, %v2845
  %v2847 = vpop.f32.mrb[0].mxu0
  %v2848 = vpop.f32.mrb[0].mxu0
  %2849 = vdwg.mxu0
  %2850 = vmatprep.subr.bf16.mxu0 %v2505
  %2851 = vmatpush1.bf16.msra.mxu0 %v2504
  %2852 = vmatprep.subr.bf16.mxu0 %v2509
  %2853 = vmatpush1.bf16.msra.mxu0 %v2508
  %2854 = vmatprep.subr.bf16.mxu0 %v2513
  %2855 = vmatpush1.bf16.msra.mxu0 %v2512
  %2856 = vmatprep.subr.bf16.mxu0 %v2517
  %2857 = vmatpush1.bf16.msra.mxu0 %v2516
  %2858 = vmatprep.subr.bf16.mxu0 %v2521
  %2859 = vmatpush1.bf16.msra.mxu0 %v2520
  %2860 = vmatprep.subr.bf16.mxu0 %v2525
  %2861 = vmatpush1.bf16.msra.mxu0 %v2524
  %2862 = vmatprep.subr.bf16.mxu0 %v2529
  %2863 = vmatpush1.bf16.msra.mxu0 %v2528
  %2864 = vmatprep.subr.bf16.mxu0 %v2533
  %2865 = vmatpush1.bf16.msra.mxu0 %v2532
  %2866 = vmatprep.subr.bf16.mxu0 %v2537
  %2867 = vmatpush1.bf16.msra.mxu0 %v2536
  %2868 = vmatprep.subr.bf16.mxu0 %v2541
  %2869 = vmatpush1.bf16.msra.mxu0 %v2540
  %2870 = vmatprep.subr.bf16.mxu0 %v2545
  %2871 = vmatpush1.bf16.msra.mxu0 %v2544
  %2872 = vmatprep.subr.bf16.mxu0 %v2549
  %2873 = vmatpush1.bf16.msra.mxu0 %v2548
  %2874 = vmatprep.subr.bf16.mxu0 %v2553
  %2875 = vmatpush1.bf16.msra.mxu0 %v2552
  %2876 = vmatprep.subr.bf16.mxu0 %v2557
  %2877 = vmatpush1.bf16.msra.mxu0 %v2556
  %2878 = vmatprep.subr.bf16.mxu0 %v2561
  %2879 = vmatpush1.bf16.msra.mxu0 %v2560
  %2880 = vmatprep.subr.bf16.mxu0 %v2565
  %2881 = vmatpush1.bf16.msra.mxu0 %v2564
  %2882 = vmatprep.mubr.bf16.mxu0 %v272
  %2883 = vmatmul.mubr.bf16.gmra.mrb[0].mxu0 %v271
  %v2884 = vpop.f32.mrb[0].mxu0
  %v2885 = vadd.f32 %v2844, %v2884
  %v2886 = vpop.f32.mrb[0].mxu0
  %v2887 = vadd.f32 %v2846, %v2886
  %v2888 = vpop.f32.mrb[0].mxu0
  %v2889 = vpop.f32.mrb[0].mxu0
  %2890 = vdwg.mxu0
  %2891 = vmatprep.subr.bf16.mxu0 %v2569
  %2892 = vmatpush1.bf16.msra.mxu0 %v2568
  %2893 = vmatprep.subr.bf16.mxu0 0
  %2894 = vmatpush1.bf16.msra.mxu0 0
  %2895 = vmatprep.subr.bf16.mxu0 0
  %2896 = vmatpush1.bf16.msra.mxu0 0
  %2897 = vmatprep.subr.bf16.mxu0 0
  %2898 = vmatpush1.bf16.msra.mxu0 0
  %2899 = vmatprep.subr.bf16.mxu0 0
  %2900 = vmatpush1.bf16.msra.mxu0 0
  %2901 = vmatprep.subr.bf16.mxu0 0
  %2902 = vmatpush1.bf16.msra.mxu0 0
  %2903 = vmatprep.subr.bf16.mxu0 0
  %2904 = vmatpush1.bf16.msra.mxu0 0
  %2905 = vmatprep.subr.bf16.mxu0 0
  %2906 = vmatpush1.bf16.msra.mxu0 0
  %2907 = vmatprep.subr.bf16.mxu0 0
  %2908 = vmatpush1.bf16.msra.mxu0 0
  %2909 = vmatprep.subr.bf16.mxu0 0
  %2910 = vmatpush1.bf16.msra.mxu0 0
  %2911 = vmatprep.subr.bf16.mxu0 0
  %2912 = vmatpush1.bf16.msra.mxu0 0
  %2913 = vmatprep.subr.bf16.mxu0 0
  %2914 = vmatpush1.bf16.msra.mxu0 0
  %2915 = vmatprep.subr.bf16.mxu0 0
  %2916 = vmatpush1.bf16.msra.mxu0 0
  %2917 = vmatprep.subr.bf16.mxu0 0
  %2918 = vmatpush1.bf16.msra.mxu0 0
  %2919 = vmatprep.subr.bf16.mxu0 0
  %2920 = vmatpush1.bf16.msra.mxu0 0
  %2921 = vmatprep.subr.bf16.mxu0 0
  %2922 = vmatpush1.bf16.msra.mxu0 0
  %2923 = vmatprep.mubr.bf16.mxu0 0
  %2924 = vmatmul.mubr.bf16.gmra.mrb[0].mxu0 %v1262
  %v2925 = vpop.f32.mrb[0].mxu0
  %v2926 = vadd.f32 %v2885, %v2925
  %v2927 = vpop.f32.mrb[0].mxu0
  %v2928 = vadd.f32 %v2887, %v2927
  %v2929 = vpop.f32.mrb[0].mxu0
  %v2930 = vpop.f32.mrb[0].mxu0
  %2931 = vdwg.mxu0
  %2932 = vmatprep.subr.bf16.mxu0 %v2379
  %2933 = vmatpush1.bf16.msra.mxu0 %v2378
  %2934 = vmatprep.subr.bf16.mxu0 %v2383
  %2935 = vmatpush1.bf16.msra.mxu0 %v2382
  %2936 = vmatprep.subr.bf16.mxu0 %v2387
  %2937 = vmatpush1.bf16.msra.mxu0 %v2386
  %2938 = vmatprep.subr.bf16.mxu0 %v2391
  %2939 = vmatpush1.bf16.msra.mxu0 %v2390
  %2940 = vmatprep.subr.bf16.mxu0 %v2395
  %2941 = vmatpush1.bf16.msra.mxu0 %v2394
  %2942 = vmatprep.subr.bf16.mxu0 %v2399
  %2943 = vmatpush1.bf16.msra.mxu0 %v2398
  %2944 = vmatprep.subr.bf16.mxu0 %v2403
  %2945 = vmatpush1.bf16.msra.mxu0 %v2402
  %2946 = vmatprep.subr.bf16.mxu0 %v2407
  %2947 = vmatpush1.bf16.msra.mxu0 %v2406
  %2948 = vmatprep.subr.bf16.mxu0 %v2411
  %2949 = vmatpush1.bf16.msra.mxu0 %v2410
  %2950 = vmatprep.subr.bf16.mxu0 %v2415
  %2951 = vmatpush1.bf16.msra.mxu0 %v2414
  %2952 = vmatprep.subr.bf16.mxu0 %v2419
  %2953 = vmatpush1.bf16.msra.mxu0 %v2418
  %2954 = vmatprep.subr.bf16.mxu0 %v2423
  %2955 = vmatpush1.bf16.msra.mxu0 %v2422
  %2956 = vmatprep.subr.bf16.mxu0 %v2427
  %2957 = vmatpush1.bf16.msra.mxu0 %v2426
  %2958 = vmatprep.subr.bf16.mxu0 %v2431
  %2959 = vmatpush1.bf16.msra.mxu0 %v2430
  %2960 = vmatprep.subr.bf16.mxu0 %v2435
  %2961 = vmatpush1.bf16.msra.mxu0 %v2434
  %2962 = vmatprep.subr.bf16.mxu0 %v2439
  %2963 = vmatpush1.bf16.msra.mxu0 %v2438
  %2964 = vmatprep.mubr.bf16.mxu0 %v268
  %2965 = vmatmul.mubr.bf16.gmra.mrb[0].mxu0 %v267
  %v2966 = vpop.f32.mrb[0].mxu0
  %v2967 = vadd.f32 0.0, %v2966
  %v2968 = vpop.f32.mrb[0].mxu0
  %v2969 = vadd.f32 0.0, %v2968
  %v2970 = vpop.f32.mrb[0].mxu0
  %v2971 = vpop.f32.mrb[0].mxu0
  %2972 = vdwg.mxu0
  %2973 = vmatprep.subr.bf16.mxu0 %v2443
  %2974 = vmatpush1.bf16.msra.mxu0 %v2442
  %2975 = vmatprep.subr.bf16.mxu0 %v2447
  %2976 = vmatpush1.bf16.msra.mxu0 %v2446
  %2977 = vmatprep.subr.bf16.mxu0 %v2451
  %2978 = vmatpush1.bf16.msra.mxu0 %v2450
  %2979 = vmatprep.subr.bf16.mxu0 %v2455
  %2980 = vmatpush1.bf16.msra.mxu0 %v2454
  %2981 = vmatprep.subr.bf16.mxu0 %v2459
  %2982 = vmatpush1.bf16.msra.mxu0 %v2458
  %2983 = vmatprep.subr.bf16.mxu0 %v2463
  %2984 = vmatpush1.bf16.msra.mxu0 %v2462
  %2985 = vmatprep.subr.bf16.mxu0 %v2467
  %2986 = vmatpush1.bf16.msra.mxu0 %v2466
  %2987 = vmatprep.subr.bf16.mxu0 %v2471
  %2988 = vmatpush1.bf16.msra.mxu0 %v2470
  %2989 = vmatprep.subr.bf16.mxu0 %v2475
  %2990 = vmatpush1.bf16.msra.mxu0 %v2474
  %2991 = vmatprep.subr.bf16.mxu0 %v2479
  %2992 = vmatpush1.bf16.msra.mxu0 %v2478
  %2993 = vmatprep.subr.bf16.mxu0 %v2483
  %2994 = vmatpush1.bf16.msra.mxu0 %v2482
  %2995 = vmatprep.subr.bf16.mxu0 %v2487
  %2996 = vmatpush1.bf16.msra.mxu0 %v2486
  %2997 = vmatprep.subr.bf16.mxu0 %v2491
  %2998 = vmatpush1.bf16.msra.mxu0 %v2490
  %2999 = vmatprep.subr.bf16.mxu0 %v2495
  %3000 = vmatpush1.bf16.msra.mxu0 %v2494
  %3001 = vmatprep.subr.bf16.mxu0 %v2499
  %3002 = vmatpush1.bf16.msra.mxu0 %v2498
  %3003 = vmatprep.subr.bf16.mxu0 %v2503
  %3004 = vmatpush1.bf16.msra.mxu0 %v2502
  %3005 = vmatprep.mubr.bf16.mxu0 %v270
  %3006 = vmatmul.mubr.bf16.gmra.mrb[0].mxu0 %v269
  %v3007 = vpop.f32.mrb[0].mxu0
  %v3008 = vadd.f32 %v2967, %v3007
  %v3009 = vpop.f32.mrb[0].mxu0
  %v3010 = vadd.f32 %v2969, %v3009
  %v3011 = vpop.f32.mrb[0].mxu0
  %v3012 = vpop.f32.mrb[0].mxu0
  %3013 = vdwg.mxu0
  %3014 = vmatprep.subr.bf16.mxu0 %v2507
  %3015 = vmatpush1.bf16.msra.mxu0 %v2506
  %3016 = vmatprep.subr.bf16.mxu0 %v2511
  %3017 = vmatpush1.bf16.msra.mxu0 %v2510
  %3018 = vmatprep.subr.bf16.mxu0 %v2515
  %3019 = vmatpush1.bf16.msra.mxu0 %v2514
  %3020 = vmatprep.subr.bf16.mxu0 %v2519
  %3021 = vmatpush1.bf16.msra.mxu0 %v2518
  %3022 = vmatprep.subr.bf16.mxu0 %v2523
  %3023 = vmatpush1.bf16.msra.mxu0 %v2522
  %3024 = vmatprep.subr.bf16.mxu0 %v2527
  %3025 = vmatpush1.bf16.msra.mxu0 %v2526
  %3026 = vmatprep.subr.bf16.mxu0 %v2531
  %3027 = vmatpush1.bf16.msra.mxu0 %v2530
  %3028 = vmatprep.subr.bf16.mxu0 %v2535
  %3029 = vmatpush1.bf16.msra.mxu0 %v2534
  %3030 = vmatprep.subr.bf16.mxu0 %v2539
  %3031 = vmatpush1.bf16.msra.mxu0 %v2538
  %3032 = vmatprep.subr.bf16.mxu0 %v2543
  %3033 = vmatpush1.bf16.msra.mxu0 %v2542
  %3034 = vmatprep.subr.bf16.mxu0 %v2547
  %3035 = vmatpush1.bf16.msra.mxu0 %v2546
  %3036 = vmatprep.subr.bf16.mxu0 %v2551
  %3037 = vmatpush1.bf16.msra.mxu0 %v2550
  %3038 = vmatprep.subr.bf16.mxu0 %v2555
  %3039 = vmatpush1.bf16.msra.mxu0 %v2554
  %3040 = vmatprep.subr.bf16.mxu0 %v2559
  %3041 = vmatpush1.bf16.msra.mxu0 %v2558
  %3042 = vmatprep.subr.bf16.mxu0 %v2563
  %3043 = vmatpush1.bf16.msra.mxu0 %v2562
  %3044 = vmatprep.subr.bf16.mxu0 %v2567
  %3045 = vmatpush1.bf16.msra.mxu0 %v2566
  %3046 = vmatprep.mubr.bf16.mxu0 %v272
  %3047 = vmatmul.mubr.bf16.gmra.mrb[0].mxu0 %v271
  %v3048 = vpop.f32.mrb[0].mxu0
  %v3049 = vadd.f32 %v3008, %v3048
  %v3050 = vpop.f32.mrb[0].mxu0
  %v3051 = vadd.f32 %v3010, %v3050
  %v3052 = vpop.f32.mrb[0].mxu0
  %v3053 = vpop.f32.mrb[0].mxu0
  %3054 = vdwg.mxu0
  %3055 = vmatprep.subr.bf16.mxu0 %v2571
  %3056 = vmatpush1.bf16.msra.mxu0 %v2570
  %3057 = vmatprep.subr.bf16.mxu0 0
  %3058 = vmatpush1.bf16.msra.mxu0 0
  %3059 = vmatprep.subr.bf16.mxu0 0
  %3060 = vmatpush1.bf16.msra.mxu0 0
  %3061 = vmatprep.subr.bf16.mxu0 0
  %3062 = vmatpush1.bf16.msra.mxu0 0
  %3063 = vmatprep.subr.bf16.mxu0 0
  %3064 = vmatpush1.bf16.msra.mxu0 0
  %3065 = vmatprep.subr.bf16.mxu0 0
  %3066 = vmatpush1.bf16.msra.mxu0 0
  %3067 = vmatprep.subr.bf16.mxu0 0
  %3068 = vmatpush1.bf16.msra.mxu0 0
  %3069 = vmatprep.subr.bf16.mxu0 0
  %3070 = vmatpush1.bf16.msra.mxu0 0
  %3071 = vmatprep.subr.bf16.mxu0 0
  %3072 = vmatpush1.bf16.msra.mxu0 0
  %3073 = vmatprep.subr.bf16.mxu0 0
  %3074 = vmatpush1.bf16.msra.mxu0 0
  %3075 = vmatprep.subr.bf16.mxu0 0
  %3076 = vmatpush1.bf16.msra.mxu0 0
  %3077 = vmatprep.subr.bf16.mxu0 0
  %3078 = vmatpush1.bf16.msra.mxu0 0
  %3079 = vmatprep.subr.bf16.mxu0 0
  %3080 = vmatpush1.bf16.msra.mxu0 0
  %3081 = vmatprep.subr.bf16.mxu0 0
  %3082 = vmatpush1.bf16.msra.mxu0 0
  %3083 = vmatprep.subr.bf16.mxu0 0
  %3084 = vmatpush1.bf16.msra.mxu0 0
  %3085 = vmatprep.subr.bf16.mxu0 0
  %3086 = vmatpush1.bf16.msra.mxu0 0
  %3087 = vmatprep.mubr.bf16.mxu0 0
  %3088 = vmatmul.mubr.bf16.gmra.mrb[0].mxu0 %v1262
  %v3089 = vpop.f32.mrb[0].mxu0
  %v3090 = vadd.f32 %v3049, %v3089
  %v3091 = vpop.f32.mrb[0].mxu0
  %v3092 = vadd.f32 %v3051, %v3091
  %v3093 = vpop.f32.mrb[0].mxu0
  %v3094 = vpop.f32.mrb[0].mxu0
  %3095 = vdwg.mxu0
  %v3096 = vmax.f32 %v1422, %v2926
  %v3097 = vmax.f32 %v1424, %v2928
  %v3098 = vmax.f32 %v1586, %v3090
  %v3099 = vmax.f32 %v1588, %v3092
  %v3100 = vld [vmem:[%s3] sm:$0xff]
  %v3101 = vld [vmem:[%s3 + $0x8] sm:$0xff]
  %v3102 = vld [vmem:[%s3 + $0x10] sm:$0xff]
  %v3103 = vld [vmem:[%s3 + $0x18] sm:$0xff]
  %v3104 = vld [vmem:[%s3 + $0x20] sm:$0xff]
  %v3105 = vld [vmem:[%s3 + $0x28] sm:$0xff]
  %v3106 = vld [vmem:[%s3 + $0x30] sm:$0xff]
  %v3107 = vld [vmem:[%s3 + $0x38] sm:$0xff]
  %v3108 = vld [vmem:[%s3 + $0x40] sm:$0xff]
  %v3109 = vld [vmem:[%s3 + $0x48] sm:$0xff]
  %v3110 = vld [vmem:[%s3 + $0x50] sm:$0xff]
  %v3111 = vld [vmem:[%s3 + $0x58] sm:$0xff]
  %v3112 = vld [vmem:[%s3 + $0x60] sm:$0xff]
  %v3113 = vld [vmem:[%s3 + $0x68] sm:$0xff]
  %v3114 = vld [vmem:[%s3 + $0x70] sm:$0xff]
  %v3115 = vld [vmem:[%s3 + $0x78] sm:$0xff]
  %v3116 = vld [vmem:[%s3 + $0x80] sm:$0xff]
  %v3117 = vld [vmem:[%s3 + $0x88] sm:$0xff]
  %v3118 = vld [vmem:[%s3 + $0x90] sm:$0xff]
  %v3119 = vld [vmem:[%s3 + $0x98] sm:$0xff]
  %v3120 = vld [vmem:[%s3 + $0xa0] sm:$0xff]
  %v3121 = vld [vmem:[%s3 + $0xa8] sm:$0xff]
  %v3122 = vld [vmem:[%s3 + $0xb0] sm:$0xff]
  %v3123 = vld [vmem:[%s3 + $0xb8] sm:$0xff]
  %v3124 = vld [vmem:[%s3 + $0xc0] sm:$0xff]
  %v3125 = vld [vmem:[%s3 + $0xc8] sm:$0xff]
  %v3126 = vld [vmem:[%s3 + $0xd0] sm:$0xff]
  %v3127 = vld [vmem:[%s3 + $0xd8] sm:$0xff]
  %v3128 = vld [vmem:[%s3 + $0xe0] sm:$0xff]
  %v3129 = vld [vmem:[%s3 + $0xe8] sm:$0xff]
  %v3130 = vld [vmem:[%s3 + $0xf0] sm:$0xff]
  %v3131 = vld [vmem:[%s3 + $0xf8] sm:$0xff]
  %v3132 = vld [vmem:[%s3 + $0x100] sm:$0xff]
  %v3133 = vld [vmem:[%s3 + $0x108] sm:$0xff]
  %v3134 = vld [vmem:[%s3 + $0x110] sm:$0xff]
  %v3135 = vld [vmem:[%s3 + $0x118] sm:$0xff]
  %v3136 = vld [vmem:[%s3 + $0x120] sm:$0xff]
  %v3137 = vld [vmem:[%s3 + $0x128] sm:$0xff]
  %v3138 = vld [vmem:[%s3 + $0x130] sm:$0xff]
  %v3139 = vld [vmem:[%s3 + $0x138] sm:$0xff]
  %v3140 = vld [vmem:[%s3 + $0x140] sm:$0xff]
  %v3141 = vld [vmem:[%s3 + $0x148] sm:$0xff]
  %v3142 = vld [vmem:[%s3 + $0x150] sm:$0xff]
  %v3143 = vld [vmem:[%s3 + $0x158] sm:$0xff]
  %v3144 = vld [vmem:[%s3 + $0x160] sm:$0xff]
  %v3145 = vld [vmem:[%s3 + $0x168] sm:$0xff]
  %v3146 = vld [vmem:[%s3 + $0x170] sm:$0xff]
  %v3147 = vld [vmem:[%s3 + $0x178] sm:$0xff]
  %v3148 = vld [vmem:[%s3 + $0x180] sm:$0xff]
  %v3149 = vld [vmem:[%s3 + $0x188] sm:$0xff]
  %v3150 = vld [vmem:[%s3 + $0x190] sm:$0xff]
  %v3151 = vld [vmem:[%s3 + $0x198] sm:$0xff]
  %v3152 = vld [vmem:[%s3 + $0x1a0] sm:$0xff]
  %v3153 = vld [vmem:[%s3 + $0x1a8] sm:$0xff]
  %v3154 = vld [vmem:[%s3 + $0x1b0] sm:$0xff]
  %v3155 = vld [vmem:[%s3 + $0x1b8] sm:$0xff]
  %v3156 = vld [vmem:[%s3 + $0x1c0] sm:$0xff]
  %v3157 = vld [vmem:[%s3 + $0x1c8] sm:$0xff]
  %v3158 = vld [vmem:[%s3 + $0x1d0] sm:$0xff]
  %v3159 = vld [vmem:[%s3 + $0x1d8] sm:$0xff]
  %v3160 = vld [vmem:[%s3 + $0x1e0] sm:$0xff]
  %v3161 = vld [vmem:[%s3 + $0x1e8] sm:$0xff]
  %v3162 = vld [vmem:[%s3 + $0x1f0] sm:$0xff]
  %v3163 = vld [vmem:[%s3 + $0x1f8] sm:$0xff]
  %v3164 = vld [vmem:[%s3 + $0x200] sm:$0xff]
  %v3165 = vld [vmem:[%s3 + $0x208] sm:$0xff]
  %v3166 = vld [vmem:[%s3 + $0x210] sm:$0xff]
  %v3167 = vld [vmem:[%s3 + $0x218] sm:$0xff]
  %v3168 = vld [vmem:[%s3 + $0x220] sm:$0xff]
  %v3169 = vld [vmem:[%s3 + $0x228] sm:$0xff]
  %v3170 = vld [vmem:[%s3 + $0x230] sm:$0xff]
  %v3171 = vld [vmem:[%s3 + $0x238] sm:$0xff]
  %v3172 = vld [vmem:[%s3 + $0x240] sm:$0xff]
  %v3173 = vld [vmem:[%s3 + $0x248] sm:$0xff]
  %v3174 = vld [vmem:[%s3 + $0x250] sm:$0xff]
  %v3175 = vld [vmem:[%s3 + $0x258] sm:$0xff]
  %v3176 = vld [vmem:[%s3 + $0x260] sm:$0xff]
  %v3177 = vld [vmem:[%s3 + $0x268] sm:$0xff]
  %v3178 = vld [vmem:[%s3 + $0x270] sm:$0xff]
  %v3179 = vld [vmem:[%s3 + $0x278] sm:$0xff]
  %v3180 = vld [vmem:[%s3 + $0x280] sm:$0xff]
  %v3181 = vld [vmem:[%s3 + $0x288] sm:$0xff]
  %v3182 = vld [vmem:[%s3 + $0x290] sm:$0xff]
  %v3183 = vld [vmem:[%s3 + $0x298] sm:$0xff]
  %v3184 = vld [vmem:[%s3 + $0x2a0] sm:$0xff]
  %v3185 = vld [vmem:[%s3 + $0x2a8] sm:$0xff]
  %v3186 = vld [vmem:[%s3 + $0x2b0] sm:$0xff]
  %v3187 = vld [vmem:[%s3 + $0x2b8] sm:$0xff]
  %v3188 = vld [vmem:[%s3 + $0x2c0] sm:$0xff]
  %v3189 = vld [vmem:[%s3 + $0x2c8] sm:$0xff]
  %v3190 = vld [vmem:[%s3 + $0x2d0] sm:$0xff]
  %v3191 = vld [vmem:[%s3 + $0x2d8] sm:$0xff]
  %v3192 = vld [vmem:[%s3 + $0x2e0] sm:$0xff]
  %v3193 = vld [vmem:[%s3 + $0x2e8] sm:$0xff]
  %v3194 = vld [vmem:[%s3 + $0x2f0] sm:$0xff]
  %v3195 = vld [vmem:[%s3 + $0x2f8] sm:$0xff]
  %v3196 = vld [vmem:[%s3 + $0x300] sm:$0xff]
  %v3197 = vld [vmem:[%s3 + $0x308] sm:$0xff]
  %v3198 = vld [vmem:[%s3 + $0x310] sm:$0xff]
  %v3199 = vld [vmem:[%s3 + $0x318] sm:$0xff]
  %v3200 = vld [vmem:[%s3 + $0x320] sm:$0xff]
  %v3201 = vld [vmem:[%s3 + $0x328] sm:$0xff]
  %v3202 = vld [vmem:[%s3 + $0x330] sm:$0xff]
  %v3203 = vld [vmem:[%s3 + $0x338] sm:$0xff]
  %v3204 = vld [vmem:[%s3 + $0x340] sm:$0xff]
  %v3205 = vld [vmem:[%s3 + $0x348] sm:$0xff]
  %v3206 = vld [vmem:[%s3 + $0x350] sm:$0xff]
  %v3207 = vld [vmem:[%s3 + $0x358] sm:$0xff]
  %v3208 = vld [vmem:[%s3 + $0x360] sm:$0xff]
  %v3209 = vld [vmem:[%s3 + $0x368] sm:$0xff]
  %v3210 = vld [vmem:[%s3 + $0x370] sm:$0xff]
  %v3211 = vld [vmem:[%s3 + $0x378] sm:$0xff]
  %v3212 = vld [vmem:[%s3 + $0x380] sm:$0xff]
  %v3213 = vld [vmem:[%s3 + $0x388] sm:$0xff]
  %v3214 = vld [vmem:[%s3 + $0x390] sm:$0xff]
  %v3215 = vld [vmem:[%s3 + $0x398] sm:$0xff]
  %v3216 = vld [vmem:[%s3 + $0x3a0] sm:$0xff]
  %v3217 = vld [vmem:[%s3 + $0x3a8] sm:$0xff]
  %v3218 = vld [vmem:[%s3 + $0x3b0] sm:$0xff]
  %v3219 = vld [vmem:[%s3 + $0x3b8] sm:$0xff]
  %v3220 = vld [vmem:[%s3 + $0x3c0] sm:$0xff]
  %v3221 = vld [vmem:[%s3 + $0x3c8] sm:$0xff]
  %v3222 = vld [vmem:[%s3 + $0x3d0] sm:$0xff]
  %v3223 = vld [vmem:[%s3 + $0x3d8] sm:$0xff]
  %v3224 = vld [vmem:[%s3 + $0x3e0] sm:$0xff]
  %v3225 = vld [vmem:[%s3 + $0x3e8] sm:$0xff]
  %v3226 = vld [vmem:[%s3 + $0x3f0] sm:$0xff]
  %v3227 = vld [vmem:[%s3 + $0x3f8] sm:$0xff]
  %v3228 = vld [vmem:[%s3 + $0x400] sm:$0xff]
  %v3229 = vld [vmem:[%s3 + $0x408] sm:$0xff]
  %v3230 = vld [vmem:[%s3 + $0x410] sm:$0xff]
  %v3231 = vld [vmem:[%s3 + $0x418] sm:$0xff]
  %v3232 = vld [vmem:[%s3 + $0x420] sm:$0xff]
  %v3233 = vld [vmem:[%s3 + $0x428] sm:$0xff]
  %v3234 = vld [vmem:[%s3 + $0x430] sm:$0xff]
  %v3235 = vld [vmem:[%s3 + $0x438] sm:$0xff]
  %v3236 = vld [vmem:[%s3 + $0x440] sm:$0xff]
  %v3237 = vld [vmem:[%s3 + $0x448] sm:$0xff]
  %v3238 = vld [vmem:[%s3 + $0x450] sm:$0xff]
  %v3239 = vld [vmem:[%s3 + $0x458] sm:$0xff]
  %v3240 = vld [vmem:[%s3 + $0x460] sm:$0xff]
  %v3241 = vld [vmem:[%s3 + $0x468] sm:$0xff]
  %v3242 = vld [vmem:[%s3 + $0x470] sm:$0xff]
  %v3243 = vld [vmem:[%s3 + $0x478] sm:$0xff]
  %v3244 = vld [vmem:[%s3 + $0x480] sm:$0xff]
  %v3245 = vld [vmem:[%s3 + $0x488] sm:$0xff]
  %v3246 = vld [vmem:[%s3 + $0x490] sm:$0xff]
  %v3247 = vld [vmem:[%s3 + $0x498] sm:$0xff]
  %v3248 = vld [vmem:[%s3 + $0x4a0] sm:$0xff]
  %v3249 = vld [vmem:[%s3 + $0x4a8] sm:$0xff]
  %v3250 = vld [vmem:[%s3 + $0x4b0] sm:$0xff]
  %v3251 = vld [vmem:[%s3 + $0x4b8] sm:$0xff]
  %v3252 = vld [vmem:[%s3 + $0x4c0] sm:$0xff]
  %v3253 = vld [vmem:[%s3 + $0x4c8] sm:$0xff]
  %v3254 = vld [vmem:[%s3 + $0x4d0] sm:$0xff]
  %v3255 = vld [vmem:[%s3 + $0x4d8] sm:$0xff]
  %v3256 = vld [vmem:[%s3 + $0x4e0] sm:$0xff]
  %v3257 = vld [vmem:[%s3 + $0x4e8] sm:$0xff]
  %v3258 = vld [vmem:[%s3 + $0x4f0] sm:$0xff]
  %v3259 = vld [vmem:[%s3 + $0x4f8] sm:$0xff]
  %v3260 = vld [vmem:[%s3 + $0x500] sm:$0xff]
  %v3261 = vld [vmem:[%s3 + $0x508] sm:$0xff]
  %v3262 = vld [vmem:[%s3 + $0x510] sm:$0xff]
  %v3263 = vld [vmem:[%s3 + $0x518] sm:$0xff]
  %v3264 = vld [vmem:[%s3 + $0x520] sm:$0xff]
  %v3265 = vld [vmem:[%s3 + $0x528] sm:$0xff]
  %v3266 = vld [vmem:[%s3 + $0x530] sm:$0xff]
  %v3267 = vld [vmem:[%s3 + $0x538] sm:$0xff]
  %v3268 = vld [vmem:[%s3 + $0x540] sm:$0xff]
  %v3269 = vld [vmem:[%s3 + $0x548] sm:$0xff]
  %v3270 = vld [vmem:[%s3 + $0x550] sm:$0xff]
  %v3271 = vld [vmem:[%s3 + $0x558] sm:$0xff]
  %v3272 = vld [vmem:[%s3 + $0x560] sm:$0xff]
  %v3273 = vld [vmem:[%s3 + $0x568] sm:$0xff]
  %v3274 = vld [vmem:[%s3 + $0x570] sm:$0xff]
  %v3275 = vld [vmem:[%s3 + $0x578] sm:$0xff]
  %v3276 = vld [vmem:[%s3 + $0x580] sm:$0xff]
  %v3277 = vld [vmem:[%s3 + $0x588] sm:$0xff]
  %v3278 = vld [vmem:[%s3 + $0x590] sm:$0xff]
  %v3279 = vld [vmem:[%s3 + $0x598] sm:$0xff]
  %v3280 = vld [vmem:[%s3 + $0x5a0] sm:$0xff]
  %v3281 = vld [vmem:[%s3 + $0x5a8] sm:$0xff]
  %v3282 = vld [vmem:[%s3 + $0x5b0] sm:$0xff]
  %v3283 = vld [vmem:[%s3 + $0x5b8] sm:$0xff]
  %v3284 = vld [vmem:[%s3 + $0x5c0] sm:$0xff]
  %v3285 = vld [vmem:[%s3 + $0x5c8] sm:$0xff]
  %v3286 = vld [vmem:[%s3 + $0x5d0] sm:$0xff]
  %v3287 = vld [vmem:[%s3 + $0x5d8] sm:$0xff]
  %v3288 = vld [vmem:[%s3 + $0x5e0] sm:$0xff]
  %v3289 = vld [vmem:[%s3 + $0x5e8] sm:$0xff]
  %v3290 = vld [vmem:[%s3 + $0x5f0] sm:$0xff]
  %v3291 = vld [vmem:[%s3 + $0x5f8] sm:$0xff]
  %v3292 = vld [vmem:[%s3 + $0x600] sm:$0xff]
  %v3293 = vld [vmem:[%s3 + $0x608] sm:$0xff]
  %v3294 = vld [vmem:[%s3 + $0x610] sm:$0xff]
  %v3295 = vld [vmem:[%s3 + $0x618] sm:$0xff]
  %v3492 = vunpack.c.l.b16 %v3100
  %v3493 = vunpack.c.h.b16 %v3100
  %v3494 = vunpack.c.l.b16 %v3101
  %v3495 = vunpack.c.h.b16 %v3101
  %v3496 = vunpack.c.l.b16 %v3102
  %v3497 = vunpack.c.h.b16 %v3102
  %v3498 = vunpack.c.l.b16 %v3103
  %v3499 = vunpack.c.h.b16 %v3103
  %v3500 = vunpack.c.l.b16 %v3104
  %v3501 = vunpack.c.h.b16 %v3104
  %v3502 = vunpack.c.l.b16 %v3105
  %v3503 = vunpack.c.h.b16 %v3105
  %v3504 = vunpack.c.l.b16 %v3106
  %v3505 = vunpack.c.h.b16 %v3106
  %v3506 = vunpack.c.l.b16 %v3107
  %v3507 = vunpack.c.h.b16 %v3107
  %v3508 = vunpack.c.l.b16 %v3108
  %v3509 = vunpack.c.h.b16 %v3108
  %v3510 = vunpack.c.l.b16 %v3109
  %v3511 = vunpack.c.h.b16 %v3109
  %v3512 = vunpack.c.l.b16 %v3110
  %v3513 = vunpack.c.h.b16 %v3110
  %v3514 = vunpack.c.l.b16 %v3111
  %v3515 = vunpack.c.h.b16 %v3111
  %v3516 = vunpack.c.l.b16 %v3112
  %v3517 = vunpack.c.h.b16 %v3112
  %v3518 = vunpack.c.l.b16 %v3113
  %v3519 = vunpack.c.h.b16 %v3113
  %v3520 = vunpack.c.l.b16 %v3114
  %v3521 = vunpack.c.h.b16 %v3114
  %v3522 = vunpack.c.l.b16 %v3115
  %v3523 = vunpack.c.h.b16 %v3115
  %v3524 = vunpack.c.l.b16 %v3116
  %v3525 = vunpack.c.h.b16 %v3116
  %v3526 = vunpack.c.l.b16 %v3117
  %v3527 = vunpack.c.h.b16 %v3117
  %v3528 = vunpack.c.l.b16 %v3118
  %v3529 = vunpack.c.h.b16 %v3118
  %v3530 = vunpack.c.l.b16 %v3119
  %v3531 = vunpack.c.h.b16 %v3119
  %v3532 = vunpack.c.l.b16 %v3120
  %v3533 = vunpack.c.h.b16 %v3120
  %v3534 = vunpack.c.l.b16 %v3121
  %v3535 = vunpack.c.h.b16 %v3121
  %v3536 = vunpack.c.l.b16 %v3122
  %v3537 = vunpack.c.h.b16 %v3122
  %v3538 = vunpack.c.l.b16 %v3123
  %v3539 = vunpack.c.h.b16 %v3123
  %v3540 = vunpack.c.l.b16 %v3124
  %v3541 = vunpack.c.h.b16 %v3124
  %v3542 = vunpack.c.l.b16 %v3125
  %v3543 = vunpack.c.h.b16 %v3125
  %v3544 = vunpack.c.l.b16 %v3126
  %v3545 = vunpack.c.h.b16 %v3126
  %v3546 = vunpack.c.l.b16 %v3127
  %v3547 = vunpack.c.h.b16 %v3127
  %v3548 = vunpack.c.l.b16 %v3128
  %v3549 = vunpack.c.h.b16 %v3128
  %v3550 = vunpack.c.l.b16 %v3129
  %v3551 = vunpack.c.h.b16 %v3129
  %v3552 = vunpack.c.l.b16 %v3130
  %v3553 = vunpack.c.h.b16 %v3130
  %v3554 = vunpack.c.l.b16 %v3131
  %v3555 = vunpack.c.h.b16 %v3131
  %v3556 = vunpack.c.l.b16 %v3132
  %v3557 = vunpack.c.h.b16 %v3132
  %v3558 = vunpack.c.l.b16 %v3133
  %v3559 = vunpack.c.h.b16 %v3133
  %v3560 = vunpack.c.l.b16 %v3134
  %v3561 = vunpack.c.h.b16 %v3134
  %v3562 = vunpack.c.l.b16 %v3135
  %v3563 = vunpack.c.h.b16 %v3135
  %v3564 = vunpack.c.l.b16 %v3136
  %v3565 = vunpack.c.h.b16 %v3136
  %v3566 = vunpack.c.l.b16 %v3137
  %v3567 = vunpack.c.h.b16 %v3137
  %v3568 = vunpack.c.l.b16 %v3138
  %v3569 = vunpack.c.h.b16 %v3138
  %v3570 = vunpack.c.l.b16 %v3139
  %v3571 = vunpack.c.h.b16 %v3139
  %v3572 = vunpack.c.l.b16 %v3140
  %v3573 = vunpack.c.h.b16 %v3140
  %v3574 = vunpack.c.l.b16 %v3141
  %v3575 = vunpack.c.h.b16 %v3141
  %v3576 = vunpack.c.l.b16 %v3142
  %v3577 = vunpack.c.h.b16 %v3142
  %v3578 = vunpack.c.l.b16 %v3143
  %v3579 = vunpack.c.h.b16 %v3143
  %v3580 = vunpack.c.l.b16 %v3144
  %v3581 = vunpack.c.h.b16 %v3144
  %v3582 = vunpack.c.l.b16 %v3145
  %v3583 = vunpack.c.h.b16 %v3145
  %v3584 = vunpack.c.l.b16 %v3146
  %v3585 = vunpack.c.h.b16 %v3146
  %v3586 = vunpack.c.l.b16 %v3147
  %v3587 = vunpack.c.h.b16 %v3147
  %v3588 = vunpack.c.l.b16 %v3148
  %v3589 = vunpack.c.h.b16 %v3148
  %v3590 = vunpack.c.l.b16 %v3149
  %v3591 = vunpack.c.h.b16 %v3149
  %v3592 = vunpack.c.l.b16 %v3150
  %v3593 = vunpack.c.h.b16 %v3150
  %v3594 = vunpack.c.l.b16 %v3151
  %v3595 = vunpack.c.h.b16 %v3151
  %v3596 = vunpack.c.l.b16 %v3152
  %v3597 = vunpack.c.h.b16 %v3152
  %v3598 = vunpack.c.l.b16 %v3153
  %v3599 = vunpack.c.h.b16 %v3153
  %v3600 = vunpack.c.l.b16 %v3154
  %v3601 = vunpack.c.h.b16 %v3154
  %v3602 = vunpack.c.l.b16 %v3155
  %v3603 = vunpack.c.h.b16 %v3155
  %v3604 = vunpack.c.l.b16 %v3156
  %v3605 = vunpack.c.h.b16 %v3156
  %v3606 = vunpack.c.l.b16 %v3157
  %v3607 = vunpack.c.h.b16 %v3157
  %v3608 = vunpack.c.l.b16 %v3158
  %v3609 = vunpack.c.h.b16 %v3158
  %v3610 = vunpack.c.l.b16 %v3159
  %v3611 = vunpack.c.h.b16 %v3159
  %v3612 = vunpack.c.l.b16 %v3160
  %v3613 = vunpack.c.h.b16 %v3160
  %v3614 = vunpack.c.l.b16 %v3161
  %v3615 = vunpack.c.h.b16 %v3161
  %v3616 = vunpack.c.l.b16 %v3162
  %v3617 = vunpack.c.h.b16 %v3162
  %v3618 = vunpack.c.l.b16 %v3163
  %v3619 = vunpack.c.h.b16 %v3163
  %v3620 = vunpack.c.l.b16 %v3164
  %v3621 = vunpack.c.h.b16 %v3164
  %v3622 = vunpack.c.l.b16 %v3165
  %v3623 = vunpack.c.h.b16 %v3165
  %v3624 = vunpack.c.l.b16 %v3166
  %v3625 = vunpack.c.h.b16 %v3166
  %v3626 = vunpack.c.l.b16 %v3167
  %v3627 = vunpack.c.h.b16 %v3167
  %v3628 = vunpack.c.l.b16 %v3168
  %v3629 = vunpack.c.h.b16 %v3168
  %v3630 = vunpack.c.l.b16 %v3169
  %v3631 = vunpack.c.h.b16 %v3169
  %v3632 = vunpack.c.l.b16 %v3170
  %v3633 = vunpack.c.h.b16 %v3170
  %v3634 = vunpack.c.l.b16 %v3171
  %v3635 = vunpack.c.h.b16 %v3171
  %v3636 = vunpack.c.l.b16 %v3172
  %v3637 = vunpack.c.h.b16 %v3172
  %v3638 = vunpack.c.l.b16 %v3173
  %v3639 = vunpack.c.h.b16 %v3173
  %v3640 = vunpack.c.l.b16 %v3174
  %v3641 = vunpack.c.h.b16 %v3174
  %v3642 = vunpack.c.l.b16 %v3175
  %v3643 = vunpack.c.h.b16 %v3175
  %v3644 = vunpack.c.l.b16 %v3176
  %v3645 = vunpack.c.h.b16 %v3176
  %v3646 = vunpack.c.l.b16 %v3177
  %v3647 = vunpack.c.h.b16 %v3177
  %v3648 = vunpack.c.l.b16 %v3178
  %v3649 = vunpack.c.h.b16 %v3178
  %v3650 = vunpack.c.l.b16 %v3179
  %v3651 = vunpack.c.h.b16 %v3179
  %v3652 = vunpack.c.l.b16 %v3180
  %v3653 = vunpack.c.h.b16 %v3180
  %v3654 = vunpack.c.l.b16 %v3181
  %v3655 = vunpack.c.h.b16 %v3181
  %v3656 = vunpack.c.l.b16 %v3182
  %v3657 = vunpack.c.h.b16 %v3182
  %v3658 = vunpack.c.l.b16 %v3183
  %v3659 = vunpack.c.h.b16 %v3183
  %v3660 = vunpack.c.l.b16 %v3184
  %v3661 = vunpack.c.h.b16 %v3184
  %v3662 = vunpack.c.l.b16 %v3185
  %v3663 = vunpack.c.h.b16 %v3185
  %v3664 = vunpack.c.l.b16 %v3186
  %v3665 = vunpack.c.h.b16 %v3186
  %v3666 = vunpack.c.l.b16 %v3187
  %v3667 = vunpack.c.h.b16 %v3187
  %v3668 = vunpack.c.l.b16 %v3188
  %v3669 = vunpack.c.h.b16 %v3188
  %v3670 = vunpack.c.l.b16 %v3189
  %v3671 = vunpack.c.h.b16 %v3189
  %v3672 = vunpack.c.l.b16 %v3190
  %v3673 = vunpack.c.h.b16 %v3190
  %v3674 = vunpack.c.l.b16 %v3191
  %v3675 = vunpack.c.h.b16 %v3191
  %v3676 = vunpack.c.l.b16 %v3192
  %v3677 = vunpack.c.h.b16 %v3192
  %v3678 = vunpack.c.l.b16 %v3193
  %v3679 = vunpack.c.h.b16 %v3193
  %v3680 = vunpack.c.l.b16 %v3194
  %v3681 = vunpack.c.h.b16 %v3194
  %v3682 = vunpack.c.l.b16 %v3195
  %v3683 = vunpack.c.h.b16 %v3195
  %v3684 = vunpack.c.l.b16 %v3196
  %v3685 = vunpack.c.h.b16 %v3196
  %v3686 = vunpack.c.l.b16 %v3197
  %v3687 = vunpack.c.h.b16 %v3197
  %v3688 = vunpack.c.l.b16 %v3198
  %v3689 = vunpack.c.h.b16 %v3198
  %v3690 = vunpack.c.l.b16 %v3199
  %v3691 = vunpack.c.h.b16 %v3199
  %v3692 = vunpack.c.l.b16 %v3200
  %v3693 = vunpack.c.h.b16 %v3200
  %v3694 = vunpack.c.l.b16 %v3201
  %v3695 = vunpack.c.h.b16 %v3201
  %v3696 = vunpack.c.l.b16 %v3202
  %v3697 = vunpack.c.h.b16 %v3202
  %v3698 = vunpack.c.l.b16 %v3203
  %v3699 = vunpack.c.h.b16 %v3203
  %v3700 = vunpack.c.l.b16 %v3204
  %v3701 = vunpack.c.h.b16 %v3204
  %v3702 = vunpack.c.l.b16 %v3205
  %v3703 = vunpack.c.h.b16 %v3205
  %v3704 = vunpack.c.l.b16 %v3206
  %v3705 = vunpack.c.h.b16 %v3206
  %v3706 = vunpack.c.l.b16 %v3207
  %v3707 = vunpack.c.h.b16 %v3207
  %v3708 = vunpack.c.l.b16 %v3208
  %v3709 = vunpack.c.h.b16 %v3208
  %v3710 = vunpack.c.l.b16 %v3209
  %v3711 = vunpack.c.h.b16 %v3209
  %v3712 = vunpack.c.l.b16 %v3210
  %v3713 = vunpack.c.h.b16 %v3210
  %v3714 = vunpack.c.l.b16 %v3211
  %v3715 = vunpack.c.h.b16 %v3211
  %v3716 = vunpack.c.l.b16 %v3212
  %v3717 = vunpack.c.h.b16 %v3212
  %v3718 = vunpack.c.l.b16 %v3213
  %v3719 = vunpack.c.h.b16 %v3213
  %v3720 = vunpack.c.l.b16 %v3214
  %v3721 = vunpack.c.h.b16 %v3214
  %v3722 = vunpack.c.l.b16 %v3215
  %v3723 = vunpack.c.h.b16 %v3215
  %v3724 = vunpack.c.l.b16 %v3216
  %v3725 = vunpack.c.h.b16 %v3216
  %v3726 = vunpack.c.l.b16 %v3217
  %v3727 = vunpack.c.h.b16 %v3217
  %v3728 = vunpack.c.l.b16 %v3218
  %v3729 = vunpack.c.h.b16 %v3218
  %v3730 = vunpack.c.l.b16 %v3219
  %v3731 = vunpack.c.h.b16 %v3219
  %v3732 = vunpack.c.l.b16 %v3220
  %v3733 = vunpack.c.h.b16 %v3220
  %v3734 = vunpack.c.l.b16 %v3221
  %v3735 = vunpack.c.h.b16 %v3221
  %v3736 = vunpack.c.l.b16 %v3222
  %v3737 = vunpack.c.h.b16 %v3222
  %v3738 = vunpack.c.l.b16 %v3223
  %v3739 = vunpack.c.h.b16 %v3223
  %v3740 = vunpack.c.l.b16 %v3224
  %v3741 = vunpack.c.h.b16 %v3224
  %v3742 = vunpack.c.l.b16 %v3225
  %v3743 = vunpack.c.h.b16 %v3225
  %v3744 = vunpack.c.l.b16 %v3226
  %v3745 = vunpack.c.h.b16 %v3226
  %v3746 = vunpack.c.l.b16 %v3227
  %v3747 = vunpack.c.h.b16 %v3227
  %v3748 = vunpack.c.l.b16 %v3228
  %v3749 = vunpack.c.h.b16 %v3228
  %v3750 = vunpack.c.l.b16 %v3229
  %v3751 = vunpack.c.h.b16 %v3229
  %v3752 = vunpack.c.l.b16 %v3230
  %v3753 = vunpack.c.h.b16 %v3230
  %v3754 = vunpack.c.l.b16 %v3231
  %v3755 = vunpack.c.h.b16 %v3231
  %v3756 = vunpack.c.l.b16 %v3232
  %v3757 = vunpack.c.h.b16 %v3232
  %v3758 = vunpack.c.l.b16 %v3233
  %v3759 = vunpack.c.h.b16 %v3233
  %v3760 = vunpack.c.l.b16 %v3234
  %v3761 = vunpack.c.h.b16 %v3234
  %v3762 = vunpack.c.l.b16 %v3235
  %v3763 = vunpack.c.h.b16 %v3235
  %v3764 = vunpack.c.l.b16 %v3236
  %v3765 = vunpack.c.h.b16 %v3236
  %v3766 = vunpack.c.l.b16 %v3237
  %v3767 = vunpack.c.h.b16 %v3237
  %v3768 = vunpack.c.l.b16 %v3238
  %v3769 = vunpack.c.h.b16 %v3238
  %v3770 = vunpack.c.l.b16 %v3239
  %v3771 = vunpack.c.h.b16 %v3239
  %v3772 = vunpack.c.l.b16 %v3240
  %v3773 = vunpack.c.h.b16 %v3240
  %v3774 = vunpack.c.l.b16 %v3241
  %v3775 = vunpack.c.h.b16 %v3241
  %v3776 = vunpack.c.l.b16 %v3242
  %v3777 = vunpack.c.h.b16 %v3242
  %v3778 = vunpack.c.l.b16 %v3243
  %v3779 = vunpack.c.h.b16 %v3243
  %v3780 = vunpack.c.l.b16 %v3244
  %v3781 = vunpack.c.h.b16 %v3244
  %v3782 = vunpack.c.l.b16 %v3245
  %v3783 = vunpack.c.h.b16 %v3245
  %v3784 = vunpack.c.l.b16 %v3246
  %v3785 = vunpack.c.h.b16 %v3246
  %v3786 = vunpack.c.l.b16 %v3247
  %v3787 = vunpack.c.h.b16 %v3247
  %v3788 = vunpack.c.l.b16 %v3248
  %v3789 = vunpack.c.h.b16 %v3248
  %v3790 = vunpack.c.l.b16 %v3249
  %v3791 = vunpack.c.h.b16 %v3249
  %v3792 = vunpack.c.l.b16 %v3250
  %v3793 = vunpack.c.h.b16 %v3250
  %v3794 = vunpack.c.l.b16 %v3251
  %v3795 = vunpack.c.h.b16 %v3251
  %v3796 = vunpack.c.l.b16 %v3252
  %v3797 = vunpack.c.h.b16 %v3252
  %v3798 = vunpack.c.l.b16 %v3253
  %v3799 = vunpack.c.h.b16 %v3253
  %v3800 = vunpack.c.l.b16 %v3254
  %v3801 = vunpack.c.h.b16 %v3254
  %v3802 = vunpack.c.l.b16 %v3255
  %v3803 = vunpack.c.h.b16 %v3255
  %v3804 = vunpack.c.l.b16 %v3256
  %v3805 = vunpack.c.h.b16 %v3256
  %v3806 = vunpack.c.l.b16 %v3257
  %v3807 = vunpack.c.h.b16 %v3257
  %v3808 = vunpack.c.l.b16 %v3258
  %v3809 = vunpack.c.h.b16 %v3258
  %v3810 = vunpack.c.l.b16 %v3259
  %v3811 = vunpack.c.h.b16 %v3259
  %v3812 = vunpack.c.l.b16 %v3260
  %v3813 = vunpack.c.h.b16 %v3260
  %v3814 = vunpack.c.l.b16 %v3261
  %v3815 = vunpack.c.h.b16 %v3261
  %v3816 = vunpack.c.l.b16 %v3262
  %v3817 = vunpack.c.h.b16 %v3262
  %v3818 = vunpack.c.l.b16 %v3263
  %v3819 = vunpack.c.h.b16 %v3263
  %v3820 = vunpack.c.l.b16 %v3264
  %v3821 = vunpack.c.h.b16 %v3264
  %v3822 = vunpack.c.l.b16 %v3265
  %v3823 = vunpack.c.h.b16 %v3265
  %v3824 = vunpack.c.l.b16 %v3266
  %v3825 = vunpack.c.h.b16 %v3266
  %v3826 = vunpack.c.l.b16 %v3267
  %v3827 = vunpack.c.h.b16 %v3267
  %v3828 = vunpack.c.l.b16 %v3268
  %v3829 = vunpack.c.h.b16 %v3268
  %v3830 = vunpack.c.l.b16 %v3269
  %v3831 = vunpack.c.h.b16 %v3269
  %v3832 = vunpack.c.l.b16 %v3270
  %v3833 = vunpack.c.h.b16 %v3270
  %v3834 = vunpack.c.l.b16 %v3271
  %v3835 = vunpack.c.h.b16 %v3271
  %v3836 = vunpack.c.l.b16 %v3272
  %v3837 = vunpack.c.h.b16 %v3272
  %v3838 = vunpack.c.l.b16 %v3273
  %v3839 = vunpack.c.h.b16 %v3273
  %v3840 = vunpack.c.l.b16 %v3274
  %v3841 = vunpack.c.h.b16 %v3274
  %v3842 = vunpack.c.l.b16 %v3275
  %v3843 = vunpack.c.h.b16 %v3275
  %v3844 = vunpack.c.l.b16 %v3276
  %v3845 = vunpack.c.h.b16 %v3276
  %v3846 = vunpack.c.l.b16 %v3277
  %v3847 = vunpack.c.h.b16 %v3277
  %v3848 = vunpack.c.l.b16 %v3278
  %v3849 = vunpack.c.h.b16 %v3278
  %v3850 = vunpack.c.l.b16 %v3279
  %v3851 = vunpack.c.h.b16 %v3279
  %v3852 = vunpack.c.l.b16 %v3280
  %v3853 = vunpack.c.h.b16 %v3280
  %v3854 = vunpack.c.l.b16 %v3281
  %v3855 = vunpack.c.h.b16 %v3281
  %v3856 = vunpack.c.l.b16 %v3282
  %v3857 = vunpack.c.h.b16 %v3282
  %v3858 = vunpack.c.l.b16 %v3283
  %v3859 = vunpack.c.h.b16 %v3283
  %v3860 = vunpack.c.l.b16 %v3284
  %v3861 = vunpack.c.h.b16 %v3284
  %v3862 = vunpack.c.l.b16 %v3285
  %v3863 = vunpack.c.h.b16 %v3285
  %v3864 = vunpack.c.l.b16 %v3286
  %v3865 = vunpack.c.h.b16 %v3286
  %v3866 = vunpack.c.l.b16 %v3287
  %v3867 = vunpack.c.h.b16 %v3287
  %v3868 = vunpack.c.l.b16 %v3288
  %v3869 = vunpack.c.h.b16 %v3288
  %v3870 = vunpack.c.l.b16 %v3289
  %v3871 = vunpack.c.h.b16 %v3289
  %v3872 = vunpack.c.l.b16 %v3290
  %v3873 = vunpack.c.h.b16 %v3290
  %v3874 = vunpack.c.l.b16 %v3291
  %v3875 = vunpack.c.h.b16 %v3291
  %v3876 = vunpack.c.l.b16 %v3292
  %v3877 = vunpack.c.h.b16 %v3292
  %v3878 = vunpack.c.l.b16 %v3293
  %v3879 = vunpack.c.h.b16 %v3293
  %v3880 = vunpack.c.l.b16 %v3294
  %v3881 = vunpack.c.h.b16 %v3294
  %v3882 = vunpack.c.l.b16 %v3295
  %v3883 = vunpack.c.h.b16 %v3295
  %v3884 = vpack.c.b16 %v3496, %v3492
  %v3885 = vpack.c.b16 %v3497, %v3493
  %v3886 = vpack.c.b16 %v3498, %v3494
  %v3887 = vpack.c.b16 %v3499, %v3495
  %v3888 = vpack.c.b16 %v3504, %v3500
  %v3889 = vpack.c.b16 %v3505, %v3501
  %v3890 = vpack.c.b16 %v3506, %v3502
  %v3891 = vpack.c.b16 %v3507, %v3503
  %v3892 = vpack.c.b16 %v3512, %v3508
  %v3893 = vpack.c.b16 %v3513, %v3509
  %v3894 = vpack.c.b16 %v3514, %v3510
  %v3895 = vpack.c.b16 %v3515, %v3511
  %v3896 = vpack.c.b16 %v3520, %v3516
  %v3897 = vpack.c.b16 %v3521, %v3517
  %v3898 = vpack.c.b16 %v3522, %v3518
  %v3899 = vpack.c.b16 %v3523, %v3519
  %v3900 = vpack.c.b16 %v3528, %v3524
  %v3901 = vpack.c.b16 %v3529, %v3525
  %v3902 = vpack.c.b16 %v3530, %v3526
  %v3903 = vpack.c.b16 %v3531, %v3527
  %v3904 = vpack.c.b16 %v3536, %v3532
  %v3905 = vpack.c.b16 %v3537, %v3533
  %v3906 = vpack.c.b16 %v3538, %v3534
  %v3907 = vpack.c.b16 %v3539, %v3535
  %v3908 = vpack.c.b16 %v3544, %v3540
  %v3909 = vpack.c.b16 %v3545, %v3541
  %v3910 = vpack.c.b16 %v3546, %v3542
  %v3911 = vpack.c.b16 %v3547, %v3543
  %v3912 = vpack.c.b16 %v3552, %v3548
  %v3913 = vpack.c.b16 %v3553, %v3549
  %v3914 = vpack.c.b16 %v3554, %v3550
  %v3915 = vpack.c.b16 %v3555, %v3551
  %v3916 = vpack.c.b16 %v3560, %v3556
  %v3917 = vpack.c.b16 %v3561, %v3557
  %v3918 = vpack.c.b16 %v3562, %v3558
  %v3919 = vpack.c.b16 %v3563, %v3559
  %v3920 = vpack.c.b16 %v3568, %v3564
  %v3921 = vpack.c.b16 %v3569, %v3565
  %v3922 = vpack.c.b16 %v3570, %v3566
  %v3923 = vpack.c.b16 %v3571, %v3567
  %v3924 = vpack.c.b16 %v3576, %v3572
  %v3925 = vpack.c.b16 %v3577, %v3573
  %v3926 = vpack.c.b16 %v3578, %v3574
  %v3927 = vpack.c.b16 %v3579, %v3575
  %v3928 = vpack.c.b16 %v3584, %v3580
  %v3929 = vpack.c.b16 %v3585, %v3581
  %v3930 = vpack.c.b16 %v3586, %v3582
  %v3931 = vpack.c.b16 %v3587, %v3583
  %v3932 = vpack.c.b16 %v3592, %v3588
  %v3933 = vpack.c.b16 %v3593, %v3589
  %v3934 = vpack.c.b16 %v3594, %v3590
  %v3935 = vpack.c.b16 %v3595, %v3591
  %v3936 = vpack.c.b16 %v3600, %v3596
  %v3937 = vpack.c.b16 %v3601, %v3597
  %v3938 = vpack.c.b16 %v3602, %v3598
  %v3939 = vpack.c.b16 %v3603, %v3599
  %v3940 = vpack.c.b16 %v3608, %v3604
  %v3941 = vpack.c.b16 %v3609, %v3605
  %v3942 = vpack.c.b16 %v3610, %v3606
  %v3943 = vpack.c.b16 %v3611, %v3607
  %v3944 = vpack.c.b16 %v3616, %v3612
  %v3945 = vpack.c.b16 %v3617, %v3613
  %v3946 = vpack.c.b16 %v3618, %v3614
  %v3947 = vpack.c.b16 %v3619, %v3615
  %v3948 = vpack.c.b16 %v3624, %v3620
  %v3949 = vpack.c.b16 %v3625, %v3621
  %v3950 = vpack.c.b16 %v3626, %v3622
  %v3951 = vpack.c.b16 %v3627, %v3623
  %v3952 = vpack.c.b16 %v3632, %v3628
  %v3953 = vpack.c.b16 %v3633, %v3629
  %v3954 = vpack.c.b16 %v3634, %v3630
  %v3955 = vpack.c.b16 %v3635, %v3631
  %v3956 = vpack.c.b16 %v3640, %v3636
  %v3957 = vpack.c.b16 %v3641, %v3637
  %v3958 = vpack.c.b16 %v3642, %v3638
  %v3959 = vpack.c.b16 %v3643, %v3639
  %v3960 = vpack.c.b16 %v3648, %v3644
  %v3961 = vpack.c.b16 %v3649, %v3645
  %v3962 = vpack.c.b16 %v3650, %v3646
  %v3963 = vpack.c.b16 %v3651, %v3647
  %v3964 = vpack.c.b16 %v3656, %v3652
  %v3965 = vpack.c.b16 %v3657, %v3653
  %v3966 = vpack.c.b16 %v3658, %v3654
  %v3967 = vpack.c.b16 %v3659, %v3655
  %v3968 = vpack.c.b16 %v3664, %v3660
  %v3969 = vpack.c.b16 %v3665, %v3661
  %v3970 = vpack.c.b16 %v3666, %v3662
  %v3971 = vpack.c.b16 %v3667, %v3663
  %v3972 = vpack.c.b16 %v3672, %v3668
  %v3973 = vpack.c.b16 %v3673, %v3669
  %v3974 = vpack.c.b16 %v3674, %v3670
  %v3975 = vpack.c.b16 %v3675, %v3671
  %v3976 = vpack.c.b16 %v3680, %v3676
  %v3977 = vpack.c.b16 %v3681, %v3677
  %v3978 = vpack.c.b16 %v3682, %v3678
  %v3979 = vpack.c.b16 %v3683, %v3679
  %v3980 = vpack.c.b16 %v3688, %v3684
  %v3981 = vpack.c.b16 %v3689, %v3685
  %v3982 = vpack.c.b16 %v3690, %v3686
  %v3983 = vpack.c.b16 %v3691, %v3687
  %v3984 = vpack.c.b16 %v3696, %v3692
  %v3985 = vpack.c.b16 %v3697, %v3693
  %v3986 = vpack.c.b16 %v3698, %v3694
  %v3987 = vpack.c.b16 %v3699, %v3695
  %v3988 = vpack.c.b16 %v3704, %v3700
  %v3989 = vpack.c.b16 %v3705, %v3701
  %v3990 = vpack.c.b16 %v3706, %v3702
  %v3991 = vpack.c.b16 %v3707, %v3703
  %v3992 = vpack.c.b16 %v3712, %v3708
  %v3993 = vpack.c.b16 %v3713, %v3709
  %v3994 = vpack.c.b16 %v3714, %v3710
  %v3995 = vpack.c.b16 %v3715, %v3711
  %v3996 = vpack.c.b16 %v3720, %v3716
  %v3997 = vpack.c.b16 %v3721, %v3717
  %v3998 = vpack.c.b16 %v3722, %v3718
  %v3999 = vpack.c.b16 %v3723, %v3719
  %v4000 = vpack.c.b16 %v3728, %v3724
  %v4001 = vpack.c.b16 %v3729, %v3725
  %v4002 = vpack.c.b16 %v3730, %v3726
  %v4003 = vpack.c.b16 %v3731, %v3727
  %v4004 = vpack.c.b16 %v3736, %v3732
  %v4005 = vpack.c.b16 %v3737, %v3733
  %v4006 = vpack.c.b16 %v3738, %v3734
  %v4007 = vpack.c.b16 %v3739, %v3735
  %v4008 = vpack.c.b16 %v3744, %v3740
  %v4009 = vpack.c.b16 %v3745, %v3741
  %v4010 = vpack.c.b16 %v3746, %v3742
  %v4011 = vpack.c.b16 %v3747, %v3743
  %v4012 = vpack.c.b16 %v3752, %v3748
  %v4013 = vpack.c.b16 %v3753, %v3749
  %v4014 = vpack.c.b16 %v3754, %v3750
  %v4015 = vpack.c.b16 %v3755, %v3751
  %v4016 = vpack.c.b16 %v3760, %v3756
  %v4017 = vpack.c.b16 %v3761, %v3757
  %v4018 = vpack.c.b16 %v3762, %v3758
  %v4019 = vpack.c.b16 %v3763, %v3759
  %v4020 = vpack.c.b16 %v3768, %v3764
  %v4021 = vpack.c.b16 %v3769, %v3765
  %v4022 = vpack.c.b16 %v3770, %v3766
  %v4023 = vpack.c.b16 %v3771, %v3767
  %v4024 = vpack.c.b16 %v3776, %v3772
  %v4025 = vpack.c.b16 %v3777, %v3773
  %v4026 = vpack.c.b16 %v3778, %v3774
  %v4027 = vpack.c.b16 %v3779, %v3775
  %v4028 = vpack.c.b16 %v3784, %v3780
  %v4029 = vpack.c.b16 %v3785, %v3781
  %v4030 = vpack.c.b16 %v3786, %v3782
  %v4031 = vpack.c.b16 %v3787, %v3783
  %v4032 = vpack.c.b16 %v3792, %v3788
  %v4033 = vpack.c.b16 %v3793, %v3789
  %v4034 = vpack.c.b16 %v3794, %v3790
  %v4035 = vpack.c.b16 %v3795, %v3791
  %v4036 = vpack.c.b16 %v3800, %v3796
  %v4037 = vpack.c.b16 %v3801, %v3797
  %v4038 = vpack.c.b16 %v3802, %v3798
  %v4039 = vpack.c.b16 %v3803, %v3799
  %v4040 = vpack.c.b16 %v3808, %v3804
  %v4041 = vpack.c.b16 %v3809, %v3805
  %v4042 = vpack.c.b16 %v3810, %v3806
  %v4043 = vpack.c.b16 %v3811, %v3807
  %v4044 = vpack.c.b16 %v3816, %v3812
  %v4045 = vpack.c.b16 %v3817, %v3813
  %v4046 = vpack.c.b16 %v3818, %v3814
  %v4047 = vpack.c.b16 %v3819, %v3815
  %v4048 = vpack.c.b16 %v3824, %v3820
  %v4049 = vpack.c.b16 %v3825, %v3821
  %v4050 = vpack.c.b16 %v3826, %v3822
  %v4051 = vpack.c.b16 %v3827, %v3823
  %v4052 = vpack.c.b16 %v3832, %v3828
  %v4053 = vpack.c.b16 %v3833, %v3829
  %v4054 = vpack.c.b16 %v3834, %v3830
  %v4055 = vpack.c.b16 %v3835, %v3831
  %v4056 = vpack.c.b16 %v3840, %v3836
  %v4057 = vpack.c.b16 %v3841, %v3837
  %v4058 = vpack.c.b16 %v3842, %v3838
  %v4059 = vpack.c.b16 %v3843, %v3839
  %v4060 = vpack.c.b16 %v3848, %v3844
  %v4061 = vpack.c.b16 %v3849, %v3845
  %v4062 = vpack.c.b16 %v3850, %v3846
  %v4063 = vpack.c.b16 %v3851, %v3847
  %v4064 = vpack.c.b16 %v3856, %v3852
  %v4065 = vpack.c.b16 %v3857, %v3853
  %v4066 = vpack.c.b16 %v3858, %v3854
  %v4067 = vpack.c.b16 %v3859, %v3855
  %v4068 = vpack.c.b16 %v3864, %v3860
  %v4069 = vpack.c.b16 %v3865, %v3861
  %v4070 = vpack.c.b16 %v3866, %v3862
  %v4071 = vpack.c.b16 %v3867, %v3863
  %v4072 = vpack.c.b16 %v3872, %v3868
  %v4073 = vpack.c.b16 %v3873, %v3869
  %v4074 = vpack.c.b16 %v3874, %v3870
  %v4075 = vpack.c.b16 %v3875, %v3871
  %v4076 = vpack.c.b16 %v3880, %v3876
  %v4077 = vpack.c.b16 %v3881, %v3877
  %v4078 = vpack.c.b16 %v3882, %v3878
  %v4079 = vpack.c.b16 %v3883, %v3879
  %4276 = vmatprep.subr.bf16.mxu0 %v3885
  %4277 = vmatpush1.bf16.msra.mxu0 %v3884
  %4278 = vmatprep.subr.bf16.mxu0 %v3889
  %4279 = vmatpush1.bf16.msra.mxu0 %v3888
  %4280 = vmatprep.subr.bf16.mxu0 %v3893
  %4281 = vmatpush1.bf16.msra.mxu0 %v3892
  %4282 = vmatprep.subr.bf16.mxu0 %v3897
  %4283 = vmatpush1.bf16.msra.mxu0 %v3896
  %4284 = vmatprep.subr.bf16.mxu0 %v3901
  %4285 = vmatpush1.bf16.msra.mxu0 %v3900
  %4286 = vmatprep.subr.bf16.mxu0 %v3905
  %4287 = vmatpush1.bf16.msra.mxu0 %v3904
  %4288 = vmatprep.subr.bf16.mxu0 %v3909
  %4289 = vmatpush1.bf16.msra.mxu0 %v3908
  %4290 = vmatprep.subr.bf16.mxu0 %v3913
  %4291 = vmatpush1.bf16.msra.mxu0 %v3912
  %4292 = vmatprep.subr.bf16.mxu0 %v3917
  %4293 = vmatpush1.bf16.msra.mxu0 %v3916
  %4294 = vmatprep.subr.bf16.mxu0 %v3921
  %4295 = vmatpush1.bf16.msra.mxu0 %v3920
  %4296 = vmatprep.subr.bf16.mxu0 %v3925
  %4297 = vmatpush1.bf16.msra.mxu0 %v3924
  %4298 = vmatprep.subr.bf16.mxu0 %v3929
  %4299 = vmatpush1.bf16.msra.mxu0 %v3928
  %4300 = vmatprep.subr.bf16.mxu0 %v3933
  %4301 = vmatpush1.bf16.msra.mxu0 %v3932
  %4302 = vmatprep.subr.bf16.mxu0 %v3937
  %4303 = vmatpush1.bf16.msra.mxu0 %v3936
  %4304 = vmatprep.subr.bf16.mxu0 %v3941
  %4305 = vmatpush1.bf16.msra.mxu0 %v3940
  %4306 = vmatprep.subr.bf16.mxu0 %v3945
  %4307 = vmatpush1.bf16.msra.mxu0 %v3944
  %4308 = vmatprep.mubr.bf16.mxu0 %v268
  %4309 = vmatmul.mubr.bf16.gmra.mrb[0].mxu0 %v267
  %v4310 = vpop.f32.mrb[0].mxu0
  %v4311 = vadd.f32 0.0, %v4310
  %v4312 = vpop.f32.mrb[0].mxu0
  %v4313 = vadd.f32 0.0, %v4312
  %v4314 = vpop.f32.mrb[0].mxu0
  %v4315 = vpop.f32.mrb[0].mxu0
  %4316 = vdwg.mxu0
  %4317 = vmatprep.subr.bf16.mxu0 %v3949
  %4318 = vmatpush1.bf16.msra.mxu0 %v3948
  %4319 = vmatprep.subr.bf16.mxu0 %v3953
  %4320 = vmatpush1.bf16.msra.mxu0 %v3952
  %4321 = vmatprep.subr.bf16.mxu0 %v3957
  %4322 = vmatpush1.bf16.msra.mxu0 %v3956
  %4323 = vmatprep.subr.bf16.mxu0 %v3961
  %4324 = vmatpush1.bf16.msra.mxu0 %v3960
  %4325 = vmatprep.subr.bf16.mxu0 %v3965
  %4326 = vmatpush1.bf16.msra.mxu0 %v3964
  %4327 = vmatprep.subr.bf16.mxu0 %v3969
  %4328 = vmatpush1.bf16.msra.mxu0 %v3968
  %4329 = vmatprep.subr.bf16.mxu0 %v3973
  %4330 = vmatpush1.bf16.msra.mxu0 %v3972
  %4331 = vmatprep.subr.bf16.mxu0 %v3977
  %4332 = vmatpush1.bf16.msra.mxu0 %v3976
  %4333 = vmatprep.subr.bf16.mxu0 %v3981
  %4334 = vmatpush1.bf16.msra.mxu0 %v3980
  %4335 = vmatprep.subr.bf16.mxu0 %v3985
  %4336 = vmatpush1.bf16.msra.mxu0 %v3984
  %4337 = vmatprep.subr.bf16.mxu0 %v3989
  %4338 = vmatpush1.bf16.msra.mxu0 %v3988
  %4339 = vmatprep.subr.bf16.mxu0 %v3993
  %4340 = vmatpush1.bf16.msra.mxu0 %v3992
  %4341 = vmatprep.subr.bf16.mxu0 %v3997
  %4342 = vmatpush1.bf16.msra.mxu0 %v3996
  %4343 = vmatprep.subr.bf16.mxu0 %v4001
  %4344 = vmatpush1.bf16.msra.mxu0 %v4000
  %4345 = vmatprep.subr.bf16.mxu0 %v4005
  %4346 = vmatpush1.bf16.msra.mxu0 %v4004
  %4347 = vmatprep.subr.bf16.mxu0 %v4009
  %4348 = vmatpush1.bf16.msra.mxu0 %v4008
  %4349 = vmatprep.mubr.bf16.mxu0 %v270
  %4350 = vmatmul.mubr.bf16.gmra.mrb[0].mxu0 %v269
  %v4351 = vpop.f32.mrb[0].mxu0
  %v4352 = vadd.f32 %v4311, %v4351
  %v4353 = vpop.f32.mrb[0].mxu0
  %v4354 = vadd.f32 %v4313, %v4353
  %v4355 = vpop.f32.mrb[0].mxu0
  %v4356 = vpop.f32.mrb[0].mxu0
  %4357 = vdwg.mxu0
  %4358 = vmatprep.subr.bf16.mxu0 %v4013
  %4359 = vmatpush1.bf16.msra.mxu0 %v4012
  %4360 = vmatprep.subr.bf16.mxu0 %v4017
  %4361 = vmatpush1.bf16.msra.mxu0 %v4016
  %4362 = vmatprep.subr.bf16.mxu0 %v4021
  %4363 = vmatpush1.bf16.msra.mxu0 %v4020
  %4364 = vmatprep.subr.bf16.mxu0 %v4025
  %4365 = vmatpush1.bf16.msra.mxu0 %v4024
  %4366 = vmatprep.subr.bf16.mxu0 %v4029
  %4367 = vmatpush1.bf16.msra.mxu0 %v4028
  %4368 = vmatprep.subr.bf16.mxu0 %v4033
  %4369 = vmatpush1.bf16.msra.mxu0 %v4032
  %4370 = vmatprep.subr.bf16.mxu0 %v4037
  %4371 = vmatpush1.bf16.msra.mxu0 %v4036
  %4372 = vmatprep.subr.bf16.mxu0 %v4041
  %4373 = vmatpush1.bf16.msra.mxu0 %v4040
  %4374 = vmatprep.subr.bf16.mxu0 %v4045
  %4375 = vmatpush1.bf16.msra.mxu0 %v4044
  %4376 = vmatprep.subr.bf16.mxu0 %v4049
  %4377 = vmatpush1.bf16.msra.mxu0 %v4048
  %4378 = vmatprep.subr.bf16.mxu0 %v4053
  %4379 = vmatpush1.bf16.msra.mxu0 %v4052
  %4380 = vmatprep.subr.bf16.mxu0 %v4057
  %4381 = vmatpush1.bf16.msra.mxu0 %v4056
  %4382 = vmatprep.subr.bf16.mxu0 %v4061
  %4383 = vmatpush1.bf16.msra.mxu0 %v4060
  %4384 = vmatprep.subr.bf16.mxu0 %v4065
  %4385 = vmatpush1.bf16.msra.mxu0 %v4064
  %4386 = vmatprep.subr.bf16.mxu0 %v4069
  %4387 = vmatpush1.bf16.msra.mxu0 %v4068
  %4388 = vmatprep.subr.bf16.mxu0 %v4073
  %4389 = vmatpush1.bf16.msra.mxu0 %v4072
  %4390 = vmatprep.mubr.bf16.mxu0 %v272
  %4391 = vmatmul.mubr.bf16.gmra.mrb[0].mxu0 %v271
  %v4392 = vpop.f32.mrb[0].mxu0
  %v4393 = vadd.f32 %v4352, %v4392
  %v4394 = vpop.f32.mrb[0].mxu0
  %v4395 = vadd.f32 %v4354, %v4394
  %v4396 = vpop.f32.mrb[0].mxu0
  %v4397 = vpop.f32.mrb[0].mxu0
  %4398 = vdwg.mxu0
  %4399 = vmatprep.subr.bf16.mxu0 %v4077
  %4400 = vmatpush1.bf16.msra.mxu0 %v4076
  %4401 = vmatprep.subr.bf16.mxu0 0
  %4402 = vmatpush1.bf16.msra.mxu0 0
  %4403 = vmatprep.subr.bf16.mxu0 0
  %4404 = vmatpush1.bf16.msra.mxu0 0
  %4405 = vmatprep.subr.bf16.mxu0 0
  %4406 = vmatpush1.bf16.msra.mxu0 0
  %4407 = vmatprep.subr.bf16.mxu0 0
  %4408 = vmatpush1.bf16.msra.mxu0 0
  %4409 = vmatprep.subr.bf16.mxu0 0
  %4410 = vmatpush1.bf16.msra.mxu0 0
  %4411 = vmatprep.subr.bf16.mxu0 0
  %4412 = vmatpush1.bf16.msra.mxu0 0
  %4413 = vmatprep.subr.bf16.mxu0 0
  %4414 = vmatpush1.bf16.msra.mxu0 0
  %4415 = vmatprep.subr.bf16.mxu0 0
  %4416 = vmatpush1.bf16.msra.mxu0 0
  %4417 = vmatprep.subr.bf16.mxu0 0
  %4418 = vmatpush1.bf16.msra.mxu0 0
  %4419 = vmatprep.subr.bf16.mxu0 0
  %4420 = vmatpush1.bf16.msra.mxu0 0
  %4421 = vmatprep.subr.bf16.mxu0 0
  %4422 = vmatpush1.bf16.msra.mxu0 0
  %4423 = vmatprep.subr.bf16.mxu0 0
  %4424 = vmatpush1.bf16.msra.mxu0 0
  %4425 = vmatprep.subr.bf16.mxu0 0
  %4426 = vmatpush1.bf16.msra.mxu0 0
  %4427 = vmatprep.subr.bf16.mxu0 0
  %4428 = vmatpush1.bf16.msra.mxu0 0
  %4429 = vmatprep.subr.bf16.mxu0 0
  %4430 = vmatpush1.bf16.msra.mxu0 0
  %4431 = vmatprep.mubr.bf16.mxu0 0
  %4432 = vmatmul.mubr.bf16.gmra.mrb[0].mxu0 %v1262
  %v4433 = vpop.f32.mrb[0].mxu0
  %v4434 = vadd.f32 %v4393, %v4433
  %v4435 = vpop.f32.mrb[0].mxu0
  %v4436 = vadd.f32 %v4395, %v4435
  %v4437 = vpop.f32.mrb[0].mxu0
  %v4438 = vpop.f32.mrb[0].mxu0
  %4439 = vdwg.mxu0
  %4440 = vmatprep.subr.bf16.mxu0 %v3887
  %4441 = vmatpush1.bf16.msra.mxu0 %v3886
  %4442 = vmatprep.subr.bf16.mxu0 %v3891
  %4443 = vmatpush1.bf16.msra.mxu0 %v3890
  %4444 = vmatprep.subr.bf16.mxu0 %v3895
  %4445 = vmatpush1.bf16.msra.mxu0 %v3894
  %4446 = vmatprep.subr.bf16.mxu0 %v3899
  %4447 = vmatpush1.bf16.msra.mxu0 %v3898
  %4448 = vmatprep.subr.bf16.mxu0 %v3903
  %4449 = vmatpush1.bf16.msra.mxu0 %v3902
  %4450 = vmatprep.subr.bf16.mxu0 %v3907
  %4451 = vmatpush1.bf16.msra.mxu0 %v3906
  %4452 = vmatprep.subr.bf16.mxu0 %v3911
  %4453 = vmatpush1.bf16.msra.mxu0 %v3910
  %4454 = vmatprep.subr.bf16.mxu0 %v3915
  %4455 = vmatpush1.bf16.msra.mxu0 %v3914
  %4456 = vmatprep.subr.bf16.mxu0 %v3919
  %4457 = vmatpush1.bf16.msra.mxu0 %v3918
  %4458 = vmatprep.subr.bf16.mxu0 %v3923
  %4459 = vmatpush1.bf16.msra.mxu0 %v3922
  %4460 = vmatprep.subr.bf16.mxu0 %v3927
  %4461 = vmatpush1.bf16.msra.mxu0 %v3926
  %4462 = vmatprep.subr.bf16.mxu0 %v3931
  %4463 = vmatpush1.bf16.msra.mxu0 %v3930
  %4464 = vmatprep.subr.bf16.mxu0 %v3935
  %4465 = vmatpush1.bf16.msra.mxu0 %v3934
  %4466 = vmatprep.subr.bf16.mxu0 %v3939
  %4467 = vmatpush1.bf16.msra.mxu0 %v3938
  %4468 = vmatprep.subr.bf16.mxu0 %v3943
  %4469 = vmatpush1.bf16.msra.mxu0 %v3942
  %4470 = vmatprep.subr.bf16.mxu0 %v3947
  %4471 = vmatpush1.bf16.msra.mxu0 %v3946
  %4472 = vmatprep.mubr.bf16.mxu0 %v268
  %4473 = vmatmul.mubr.bf16.gmra.mrb[0].mxu0 %v267
  %v4474 = vpop.f32.mrb[0].mxu0
  %v4475 = vadd.f32 0.0, %v4474
  %v4476 = vpop.f32.mrb[0].mxu0
  %v4477 = vadd.f32 0.0, %v4476
  %v4478 = vpop.f32.mrb[0].mxu0
  %v4479 = vpop.f32.mrb[0].mxu0
  %4480 = vdwg.mxu0
  %4481 = vmatprep.subr.bf16.mxu0 %v3951
  %4482 = vmatpush1.bf16.msra.mxu0 %v3950
  %4483 = vmatprep.subr.bf16.mxu0 %v3955
  %4484 = vmatpush1.bf16.msra.mxu0 %v3954
  %4485 = vmatprep.subr.bf16.mxu0 %v3959
  %4486 = vmatpush1.bf16.msra.mxu0 %v3958
  %4487 = vmatprep.subr.bf16.mxu0 %v3963
  %4488 = vmatpush1.bf16.msra.mxu0 %v3962
  %4489 = vmatprep.subr.bf16.mxu0 %v3967
  %4490 = vmatpush1.bf16.msra.mxu0 %v3966
  %4491 = vmatprep.subr.bf16.mxu0 %v3971
  %4492 = vmatpush1.bf16.msra.mxu0 %v3970
  %4493 = vmatprep.subr.bf16.mxu0 %v3975
  %4494 = vmatpush1.bf16.msra.mxu0 %v3974
  %4495 = vmatprep.subr.bf16.mxu0 %v3979
  %4496 = vmatpush1.bf16.msra.mxu0 %v3978
  %4497 = vmatprep.subr.bf16.mxu0 %v3983
  %4498 = vmatpush1.bf16.msra.mxu0 %v3982
  %4499 = vmatprep.subr.bf16.mxu0 %v3987
  %4500 = vmatpush1.bf16.msra.mxu0 %v3986
  %4501 = vmatprep.subr.bf16.mxu0 %v3991
  %4502 = vmatpush1.bf16.msra.mxu0 %v3990
  %4503 = vmatprep.subr.bf16.mxu0 %v3995
  %4504 = vmatpush1.bf16.msra.mxu0 %v3994
  %4505 = vmatprep.subr.bf16.mxu0 %v3999
  %4506 = vmatpush1.bf16.msra.mxu0 %v3998
  %4507 = vmatprep.subr.bf16.mxu0 %v4003
  %4508 = vmatpush1.bf16.msra.mxu0 %v4002
  %4509 = vmatprep.subr.bf16.mxu0 %v4007
  %4510 = vmatpush1.bf16.msra.mxu0 %v4006
  %4511 = vmatprep.subr.bf16.mxu0 %v4011
  %4512 = vmatpush1.bf16.msra.mxu0 %v4010
  %4513 = vmatprep.mubr.bf16.mxu0 %v270
  %4514 = vmatmul.mubr.bf16.gmra.mrb[0].mxu0 %v269
  %v4515 = vpop.f32.mrb[0].mxu0
  %v4516 = vadd.f32 %v4475, %v4515
  %v4517 = vpop.f32.mrb[0].mxu0
  %v4518 = vadd.f32 %v4477, %v4517
  %v4519 = vpop.f32.mrb[0].mxu0
  %v4520 = vpop.f32.mrb[0].mxu0
  %4521 = vdwg.mxu0
  %4522 = vmatprep.subr.bf16.mxu0 %v4015
  %4523 = vmatpush1.bf16.msra.mxu0 %v4014
  %4524 = vmatprep.subr.bf16.mxu0 %v4019
  %4525 = vmatpush1.bf16.msra.mxu0 %v4018
  %4526 = vmatprep.subr.bf16.mxu0 %v4023
  %4527 = vmatpush1.bf16.msra.mxu0 %v4022
  %4528 = vmatprep.subr.bf16.mxu0 %v4027
  %4529 = vmatpush1.bf16.msra.mxu0 %v4026
  %4530 = vmatprep.subr.bf16.mxu0 %v4031
  %4531 = vmatpush1.bf16.msra.mxu0 %v4030
  %4532 = vmatprep.subr.bf16.mxu0 %v4035
  %4533 = vmatpush1.bf16.msra.mxu0 %v4034
  %4534 = vmatprep.subr.bf16.mxu0 %v4039
  %4535 = vmatpush1.bf16.msra.mxu0 %v4038
  %4536 = vmatprep.subr.bf16.mxu0 %v4043
  %4537 = vmatpush1.bf16.msra.mxu0 %v4042
  %4538 = vmatprep.subr.bf16.mxu0 %v4047
  %4539 = vmatpush1.bf16.msra.mxu0 %v4046
  %4540 = vmatprep.subr.bf16.mxu0 %v4051
  %4541 = vmatpush1.bf16.msra.mxu0 %v4050
  %4542 = vmatprep.subr.bf16.mxu0 %v4055
  %4543 = vmatpush1.bf16.msra.mxu0 %v4054
  %4544 = vmatprep.subr.bf16.mxu0 %v4059
  %4545 = vmatpush1.bf16.msra.mxu0 %v4058
  %4546 = vmatprep.subr.bf16.mxu0 %v4063
  %4547 = vmatpush1.bf16.msra.mxu0 %v4062
  %4548 = vmatprep.subr.bf16.mxu0 %v4067
  %4549 = vmatpush1.bf16.msra.mxu0 %v4066
  %4550 = vmatprep.subr.bf16.mxu0 %v4071
  %4551 = vmatpush1.bf16.msra.mxu0 %v4070
  %4552 = vmatprep.subr.bf16.mxu0 %v4075
  %4553 = vmatpush1.bf16.msra.mxu0 %v4074
  %4554 = vmatprep.mubr.bf16.mxu0 %v272
  %4555 = vmatmul.mubr.bf16.gmra.mrb[0].mxu0 %v271
  %v4556 = vpop.f32.mrb[0].mxu0
  %v4557 = vadd.f32 %v4516, %v4556
  %v4558 = vpop.f32.mrb[0].mxu0
  %v4559 = vadd.f32 %v4518, %v4558
  %v4560 = vpop.f32.mrb[0].mxu0
  %v4561 = vpop.f32.mrb[0].mxu0
  %4562 = vdwg.mxu0
  %4563 = vmatprep.subr.bf16.mxu0 %v4079
  %4564 = vmatpush1.bf16.msra.mxu0 %v4078
  %4565 = vmatprep.subr.bf16.mxu0 0
  %4566 = vmatpush1.bf16.msra.mxu0 0
  %4567 = vmatprep.subr.bf16.mxu0 0
  %4568 = vmatpush1.bf16.msra.mxu0 0
  %4569 = vmatprep.subr.bf16.mxu0 0
  %4570 = vmatpush1.bf16.msra.mxu0 0
  %4571 = vmatprep.subr.bf16.mxu0 0
  %4572 = vmatpush1.bf16.msra.mxu0 0
  %4573 = vmatprep.subr.bf16.mxu0 0
  %4574 = vmatpush1.bf16.msra.mxu0 0
  %4575 = vmatprep.subr.bf16.mxu0 0
  %4576 = vmatpush1.bf16.msra.mxu0 0
  %4577 = vmatprep.subr.bf16.mxu0 0
  %4578 = vmatpush1.bf16.msra.mxu0 0
  %4579 = vmatprep.subr.bf16.mxu0 0
  %4580 = vmatpush1.bf16.msra.mxu0 0
  %4581 = vmatprep.subr.bf16.mxu0 0
  %4582 = vmatpush1.bf16.msra.mxu0 0
  %4583 = vmatprep.subr.bf16.mxu0 0
  %4584 = vmatpush1.bf16.msra.mxu0 0
  %4585 = vmatprep.subr.bf16.mxu0 0
  %4586 = vmatpush1.bf16.msra.mxu0 0
  %4587 = vmatprep.subr.bf16.mxu0 0
  %4588 = vmatpush1.bf16.msra.mxu0 0
  %4589 = vmatprep.subr.bf16.mxu0 0
  %4590 = vmatpush1.bf16.msra.mxu0 0
  %4591 = vmatprep.subr.bf16.mxu0 0
  %4592 = vmatpush1.bf16.msra.mxu0 0
  %4593 = vmatprep.subr.bf16.mxu0 0
  %4594 = vmatpush1.bf16.msra.mxu0 0
  %4595 = vmatprep.mubr.bf16.mxu0 0
  %4596 = vmatmul.mubr.bf16.gmra.mrb[0].mxu0 %v1262
  %v4597 = vpop.f32.mrb[0].mxu0
  %v4598 = vadd.f32 %v4557, %v4597
  %v4599 = vpop.f32.mrb[0].mxu0
  %v4600 = vadd.f32 %v4559, %v4599
  %v4601 = vpop.f32.mrb[0].mxu0
  %v4602 = vpop.f32.mrb[0].mxu0
  %4603 = vdwg.mxu0
  %v4604 = vld [vmem:[%s4] sm:$0xff]
  %v4605 = vld [vmem:[%s4 + $0x8] sm:$0xff]
  %v4606 = vld [vmem:[%s4 + $0x10] sm:$0xff]
  %v4607 = vld [vmem:[%s4 + $0x18] sm:$0xff]
  %v4608 = vld [vmem:[%s4 + $0x20] sm:$0xff]
  %v4609 = vld [vmem:[%s4 + $0x28] sm:$0xff]
  %v4610 = vld [vmem:[%s4 + $0x30] sm:$0xff]
  %v4611 = vld [vmem:[%s4 + $0x38] sm:$0xff]
  %v4612 = vld [vmem:[%s4 + $0x40] sm:$0xff]
  %v4613 = vld [vmem:[%s4 + $0x48] sm:$0xff]
  %v4614 = vld [vmem:[%s4 + $0x50] sm:$0xff]
  %v4615 = vld [vmem:[%s4 + $0x58] sm:$0xff]
  %v4616 = vld [vmem:[%s4 + $0x60] sm:$0xff]
  %v4617 = vld [vmem:[%s4 + $0x68] sm:$0xff]
  %v4618 = vld [vmem:[%s4 + $0x70] sm:$0xff]
  %v4619 = vld [vmem:[%s4 + $0x78] sm:$0xff]
  %v4620 = vld [vmem:[%s4 + $0x80] sm:$0xff]
  %v4621 = vld [vmem:[%s4 + $0x88] sm:$0xff]
  %v4622 = vld [vmem:[%s4 + $0x90] sm:$0xff]
  %v4623 = vld [vmem:[%s4 + $0x98] sm:$0xff]
  %v4624 = vld [vmem:[%s4 + $0xa0] sm:$0xff]
  %v4625 = vld [vmem:[%s4 + $0xa8] sm:$0xff]
  %v4626 = vld [vmem:[%s4 + $0xb0] sm:$0xff]
  %v4627 = vld [vmem:[%s4 + $0xb8] sm:$0xff]
  %v4628 = vld [vmem:[%s4 + $0xc0] sm:$0xff]
  %v4629 = vld [vmem:[%s4 + $0xc8] sm:$0xff]
  %v4630 = vld [vmem:[%s4 + $0xd0] sm:$0xff]
  %v4631 = vld [vmem:[%s4 + $0xd8] sm:$0xff]
  %v4632 = vld [vmem:[%s4 + $0xe0] sm:$0xff]
  %v4633 = vld [vmem:[%s4 + $0xe8] sm:$0xff]
  %v4634 = vld [vmem:[%s4 + $0xf0] sm:$0xff]
  %v4635 = vld [vmem:[%s4 + $0xf8] sm:$0xff]
  %v4636 = vld [vmem:[%s4 + $0x100] sm:$0xff]
  %v4637 = vld [vmem:[%s4 + $0x108] sm:$0xff]
  %v4638 = vld [vmem:[%s4 + $0x110] sm:$0xff]
  %v4639 = vld [vmem:[%s4 + $0x118] sm:$0xff]
  %v4640 = vld [vmem:[%s4 + $0x120] sm:$0xff]
  %v4641 = vld [vmem:[%s4 + $0x128] sm:$0xff]
  %v4642 = vld [vmem:[%s4 + $0x130] sm:$0xff]
  %v4643 = vld [vmem:[%s4 + $0x138] sm:$0xff]
  %v4644 = vld [vmem:[%s4 + $0x140] sm:$0xff]
  %v4645 = vld [vmem:[%s4 + $0x148] sm:$0xff]
  %v4646 = vld [vmem:[%s4 + $0x150] sm:$0xff]
  %v4647 = vld [vmem:[%s4 + $0x158] sm:$0xff]
  %v4648 = vld [vmem:[%s4 + $0x160] sm:$0xff]
  %v4649 = vld [vmem:[%s4 + $0x168] sm:$0xff]
  %v4650 = vld [vmem:[%s4 + $0x170] sm:$0xff]
  %v4651 = vld [vmem:[%s4 + $0x178] sm:$0xff]
  %v4652 = vld [vmem:[%s4 + $0x180] sm:$0xff]
  %v4653 = vld [vmem:[%s4 + $0x188] sm:$0xff]
  %v4654 = vld [vmem:[%s4 + $0x190] sm:$0xff]
  %v4655 = vld [vmem:[%s4 + $0x198] sm:$0xff]
  %v4656 = vld [vmem:[%s4 + $0x1a0] sm:$0xff]
  %v4657 = vld [vmem:[%s4 + $0x1a8] sm:$0xff]
  %v4658 = vld [vmem:[%s4 + $0x1b0] sm:$0xff]
  %v4659 = vld [vmem:[%s4 + $0x1b8] sm:$0xff]
  %v4660 = vld [vmem:[%s4 + $0x1c0] sm:$0xff]
  %v4661 = vld [vmem:[%s4 + $0x1c8] sm:$0xff]
  %v4662 = vld [vmem:[%s4 + $0x1d0] sm:$0xff]
  %v4663 = vld [vmem:[%s4 + $0x1d8] sm:$0xff]
  %v4664 = vld [vmem:[%s4 + $0x1e0] sm:$0xff]
  %v4665 = vld [vmem:[%s4 + $0x1e8] sm:$0xff]
  %v4666 = vld [vmem:[%s4 + $0x1f0] sm:$0xff]
  %v4667 = vld [vmem:[%s4 + $0x1f8] sm:$0xff]
  %v4668 = vld [vmem:[%s4 + $0x200] sm:$0xff]
  %v4669 = vld [vmem:[%s4 + $0x208] sm:$0xff]
  %v4670 = vld [vmem:[%s4 + $0x210] sm:$0xff]
  %v4671 = vld [vmem:[%s4 + $0x218] sm:$0xff]
  %v4672 = vld [vmem:[%s4 + $0x220] sm:$0xff]
  %v4673 = vld [vmem:[%s4 + $0x228] sm:$0xff]
  %v4674 = vld [vmem:[%s4 + $0x230] sm:$0xff]
  %v4675 = vld [vmem:[%s4 + $0x238] sm:$0xff]
  %v4676 = vld [vmem:[%s4 + $0x240] sm:$0xff]
  %v4677 = vld [vmem:[%s4 + $0x248] sm:$0xff]
  %v4678 = vld [vmem:[%s4 + $0x250] sm:$0xff]
  %v4679 = vld [vmem:[%s4 + $0x258] sm:$0xff]
  %v4680 = vld [vmem:[%s4 + $0x260] sm:$0xff]
  %v4681 = vld [vmem:[%s4 + $0x268] sm:$0xff]
  %v4682 = vld [vmem:[%s4 + $0x270] sm:$0xff]
  %v4683 = vld [vmem:[%s4 + $0x278] sm:$0xff]
  %v4684 = vld [vmem:[%s4 + $0x280] sm:$0xff]
  %v4685 = vld [vmem:[%s4 + $0x288] sm:$0xff]
  %v4686 = vld [vmem:[%s4 + $0x290] sm:$0xff]
  %v4687 = vld [vmem:[%s4 + $0x298] sm:$0xff]
  %v4688 = vld [vmem:[%s4 + $0x2a0] sm:$0xff]
  %v4689 = vld [vmem:[%s4 + $0x2a8] sm:$0xff]
  %v4690 = vld [vmem:[%s4 + $0x2b0] sm:$0xff]
  %v4691 = vld [vmem:[%s4 + $0x2b8] sm:$0xff]
  %v4692 = vld [vmem:[%s4 + $0x2c0] sm:$0xff]
  %v4693 = vld [vmem:[%s4 + $0x2c8] sm:$0xff]
  %v4694 = vld [vmem:[%s4 + $0x2d0] sm:$0xff]
  %v4695 = vld [vmem:[%s4 + $0x2d8] sm:$0xff]
  %v4696 = vld [vmem:[%s4 + $0x2e0] sm:$0xff]
  %v4697 = vld [vmem:[%s4 + $0x2e8] sm:$0xff]
  %v4698 = vld [vmem:[%s4 + $0x2f0] sm:$0xff]
  %v4699 = vld [vmem:[%s4 + $0x2f8] sm:$0xff]
  %v4700 = vld [vmem:[%s4 + $0x300] sm:$0xff]
  %v4701 = vld [vmem:[%s4 + $0x308] sm:$0xff]
  %v4702 = vld [vmem:[%s4 + $0x310] sm:$0xff]
  %v4703 = vld [vmem:[%s4 + $0x318] sm:$0xff]
  %v4704 = vld [vmem:[%s4 + $0x320] sm:$0xff]
  %v4705 = vld [vmem:[%s4 + $0x328] sm:$0xff]
  %v4706 = vld [vmem:[%s4 + $0x330] sm:$0xff]
  %v4707 = vld [vmem:[%s4 + $0x338] sm:$0xff]
  %v4708 = vld [vmem:[%s4 + $0x340] sm:$0xff]
  %v4709 = vld [vmem:[%s4 + $0x348] sm:$0xff]
  %v4710 = vld [vmem:[%s4 + $0x350] sm:$0xff]
  %v4711 = vld [vmem:[%s4 + $0x358] sm:$0xff]
  %v4712 = vld [vmem:[%s4 + $0x360] sm:$0xff]
  %v4713 = vld [vmem:[%s4 + $0x368] sm:$0xff]
  %v4714 = vld [vmem:[%s4 + $0x370] sm:$0xff]
  %v4715 = vld [vmem:[%s4 + $0x378] sm:$0xff]
  %v4716 = vld [vmem:[%s4 + $0x380] sm:$0xff]
  %v4717 = vld [vmem:[%s4 + $0x388] sm:$0xff]
  %v4718 = vld [vmem:[%s4 + $0x390] sm:$0xff]
  %v4719 = vld [vmem:[%s4 + $0x398] sm:$0xff]
  %v4720 = vld [vmem:[%s4 + $0x3a0] sm:$0xff]
  %v4721 = vld [vmem:[%s4 + $0x3a8] sm:$0xff]
  %v4722 = vld [vmem:[%s4 + $0x3b0] sm:$0xff]
  %v4723 = vld [vmem:[%s4 + $0x3b8] sm:$0xff]
  %v4724 = vld [vmem:[%s4 + $0x3c0] sm:$0xff]
  %v4725 = vld [vmem:[%s4 + $0x3c8] sm:$0xff]
  %v4726 = vld [vmem:[%s4 + $0x3d0] sm:$0xff]
  %v4727 = vld [vmem:[%s4 + $0x3d8] sm:$0xff]
  %v4728 = vld [vmem:[%s4 + $0x3e0] sm:$0xff]
  %v4729 = vld [vmem:[%s4 + $0x3e8] sm:$0xff]
  %v4730 = vld [vmem:[%s4 + $0x3f0] sm:$0xff]
  %v4731 = vld [vmem:[%s4 + $0x3f8] sm:$0xff]
  %v4732 = vld [vmem:[%s4 + $0x400] sm:$0xff]
  %v4733 = vld [vmem:[%s4 + $0x408] sm:$0xff]
  %v4734 = vld [vmem:[%s4 + $0x410] sm:$0xff]
  %v4735 = vld [vmem:[%s4 + $0x418] sm:$0xff]
  %v4736 = vld [vmem:[%s4 + $0x420] sm:$0xff]
  %v4737 = vld [vmem:[%s4 + $0x428] sm:$0xff]
  %v4738 = vld [vmem:[%s4 + $0x430] sm:$0xff]
  %v4739 = vld [vmem:[%s4 + $0x438] sm:$0xff]
  %v4740 = vld [vmem:[%s4 + $0x440] sm:$0xff]
  %v4741 = vld [vmem:[%s4 + $0x448] sm:$0xff]
  %v4742 = vld [vmem:[%s4 + $0x450] sm:$0xff]
  %v4743 = vld [vmem:[%s4 + $0x458] sm:$0xff]
  %v4744 = vld [vmem:[%s4 + $0x460] sm:$0xff]
  %v4745 = vld [vmem:[%s4 + $0x468] sm:$0xff]
  %v4746 = vld [vmem:[%s4 + $0x470] sm:$0xff]
  %v4747 = vld [vmem:[%s4 + $0x478] sm:$0xff]
  %v4748 = vld [vmem:[%s4 + $0x480] sm:$0xff]
  %v4749 = vld [vmem:[%s4 + $0x488] sm:$0xff]
  %v4750 = vld [vmem:[%s4 + $0x490] sm:$0xff]
  %v4751 = vld [vmem:[%s4 + $0x498] sm:$0xff]
  %v4752 = vld [vmem:[%s4 + $0x4a0] sm:$0xff]
  %v4753 = vld [vmem:[%s4 + $0x4a8] sm:$0xff]
  %v4754 = vld [vmem:[%s4 + $0x4b0] sm:$0xff]
  %v4755 = vld [vmem:[%s4 + $0x4b8] sm:$0xff]
  %v4756 = vld [vmem:[%s4 + $0x4c0] sm:$0xff]
  %v4757 = vld [vmem:[%s4 + $0x4c8] sm:$0xff]
  %v4758 = vld [vmem:[%s4 + $0x4d0] sm:$0xff]
  %v4759 = vld [vmem:[%s4 + $0x4d8] sm:$0xff]
  %v4760 = vld [vmem:[%s4 + $0x4e0] sm:$0xff]
  %v4761 = vld [vmem:[%s4 + $0x4e8] sm:$0xff]
  %v4762 = vld [vmem:[%s4 + $0x4f0] sm:$0xff]
  %v4763 = vld [vmem:[%s4 + $0x4f8] sm:$0xff]
  %v4764 = vld [vmem:[%s4 + $0x500] sm:$0xff]
  %v4765 = vld [vmem:[%s4 + $0x508] sm:$0xff]
  %v4766 = vld [vmem:[%s4 + $0x510] sm:$0xff]
  %v4767 = vld [vmem:[%s4 + $0x518] sm:$0xff]
  %v4768 = vld [vmem:[%s4 + $0x520] sm:$0xff]
  %v4769 = vld [vmem:[%s4 + $0x528] sm:$0xff]
  %v4770 = vld [vmem:[%s4 + $0x530] sm:$0xff]
  %v4771 = vld [vmem:[%s4 + $0x538] sm:$0xff]
  %v4772 = vld [vmem:[%s4 + $0x540] sm:$0xff]
  %v4773 = vld [vmem:[%s4 + $0x548] sm:$0xff]
  %v4774 = vld [vmem:[%s4 + $0x550] sm:$0xff]
  %v4775 = vld [vmem:[%s4 + $0x558] sm:$0xff]
  %v4776 = vld [vmem:[%s4 + $0x560] sm:$0xff]
  %v4777 = vld [vmem:[%s4 + $0x568] sm:$0xff]
  %v4778 = vld [vmem:[%s4 + $0x570] sm:$0xff]
  %v4779 = vld [vmem:[%s4 + $0x578] sm:$0xff]
  %v4780 = vld [vmem:[%s4 + $0x580] sm:$0xff]
  %v4781 = vld [vmem:[%s4 + $0x588] sm:$0xff]
  %v4782 = vld [vmem:[%s4 + $0x590] sm:$0xff]
  %v4783 = vld [vmem:[%s4 + $0x598] sm:$0xff]
  %v4784 = vld [vmem:[%s4 + $0x5a0] sm:$0xff]
  %v4785 = vld [vmem:[%s4 + $0x5a8] sm:$0xff]
  %v4786 = vld [vmem:[%s4 + $0x5b0] sm:$0xff]
  %v4787 = vld [vmem:[%s4 + $0x5b8] sm:$0xff]
  %v4788 = vld [vmem:[%s4 + $0x5c0] sm:$0xff]
  %v4789 = vld [vmem:[%s4 + $0x5c8] sm:$0xff]
  %v4790 = vld [vmem:[%s4 + $0x5d0] sm:$0xff]
  %v4791 = vld [vmem:[%s4 + $0x5d8] sm:$0xff]
  %v4792 = vld [vmem:[%s4 + $0x5e0] sm:$0xff]
  %v4793 = vld [vmem:[%s4 + $0x5e8] sm:$0xff]
  %v4794 = vld [vmem:[%s4 + $0x5f0] sm:$0xff]
  %v4795 = vld [vmem:[%s4 + $0x5f8] sm:$0xff]
  %v4796 = vld [vmem:[%s4 + $0x600] sm:$0xff]
  %v4797 = vld [vmem:[%s4 + $0x608] sm:$0xff]
  %v4798 = vld [vmem:[%s4 + $0x610] sm:$0xff]
  %v4799 = vld [vmem:[%s4 + $0x618] sm:$0xff]
  %v4996 = vunpack.c.l.b16 %v4604
  %v4997 = vunpack.c.h.b16 %v4604
  %v4998 = vunpack.c.l.b16 %v4605
  %v4999 = vunpack.c.h.b16 %v4605
  %v5000 = vunpack.c.l.b16 %v4606
  %v5001 = vunpack.c.h.b16 %v4606
  %v5002 = vunpack.c.l.b16 %v4607
  %v5003 = vunpack.c.h.b16 %v4607
  %v5004 = vunpack.c.l.b16 %v4608
  %v5005 = vunpack.c.h.b16 %v4608
  %v5006 = vunpack.c.l.b16 %v4609
  %v5007 = vunpack.c.h.b16 %v4609
  %v5008 = vunpack.c.l.b16 %v4610
  %v5009 = vunpack.c.h.b16 %v4610
  %v5010 = vunpack.c.l.b16 %v4611
  %v5011 = vunpack.c.h.b16 %v4611
  %v5012 = vunpack.c.l.b16 %v4612
  %v5013 = vunpack.c.h.b16 %v4612
  %v5014 = vunpack.c.l.b16 %v4613
  %v5015 = vunpack.c.h.b16 %v4613
  %v5016 = vunpack.c.l.b16 %v4614
  %v5017 = vunpack.c.h.b16 %v4614
  %v5018 = vunpack.c.l.b16 %v4615
  %v5019 = vunpack.c.h.b16 %v4615
  %v5020 = vunpack.c.l.b16 %v4616
  %v5021 = vunpack.c.h.b16 %v4616
  %v5022 = vunpack.c.l.b16 %v4617
  %v5023 = vunpack.c.h.b16 %v4617
  %v5024 = vunpack.c.l.b16 %v4618
  %v5025 = vunpack.c.h.b16 %v4618
  %v5026 = vunpack.c.l.b16 %v4619
  %v5027 = vunpack.c.h.b16 %v4619
  %v5028 = vunpack.c.l.b16 %v4620
  %v5029 = vunpack.c.h.b16 %v4620
  %v5030 = vunpack.c.l.b16 %v4621
  %v5031 = vunpack.c.h.b16 %v4621
  %v5032 = vunpack.c.l.b16 %v4622
  %v5033 = vunpack.c.h.b16 %v4622
  %v5034 = vunpack.c.l.b16 %v4623
  %v5035 = vunpack.c.h.b16 %v4623
  %v5036 = vunpack.c.l.b16 %v4624
  %v5037 = vunpack.c.h.b16 %v4624
  %v5038 = vunpack.c.l.b16 %v4625
  %v5039 = vunpack.c.h.b16 %v4625
  %v5040 = vunpack.c.l.b16 %v4626
  %v5041 = vunpack.c.h.b16 %v4626
  %v5042 = vunpack.c.l.b16 %v4627
  %v5043 = vunpack.c.h.b16 %v4627
  %v5044 = vunpack.c.l.b16 %v4628
  %v5045 = vunpack.c.h.b16 %v4628
  %v5046 = vunpack.c.l.b16 %v4629
  %v5047 = vunpack.c.h.b16 %v4629
  %v5048 = vunpack.c.l.b16 %v4630
  %v5049 = vunpack.c.h.b16 %v4630
  %v5050 = vunpack.c.l.b16 %v4631
  %v5051 = vunpack.c.h.b16 %v4631
  %v5052 = vunpack.c.l.b16 %v4632
  %v5053 = vunpack.c.h.b16 %v4632
  %v5054 = vunpack.c.l.b16 %v4633
  %v5055 = vunpack.c.h.b16 %v4633
  %v5056 = vunpack.c.l.b16 %v4634
  %v5057 = vunpack.c.h.b16 %v4634
  %v5058 = vunpack.c.l.b16 %v4635
  %v5059 = vunpack.c.h.b16 %v4635
  %v5060 = vunpack.c.l.b16 %v4636
  %v5061 = vunpack.c.h.b16 %v4636
  %v5062 = vunpack.c.l.b16 %v4637
  %v5063 = vunpack.c.h.b16 %v4637
  %v5064 = vunpack.c.l.b16 %v4638
  %v5065 = vunpack.c.h.b16 %v4638
  %v5066 = vunpack.c.l.b16 %v4639
  %v5067 = vunpack.c.h.b16 %v4639
  %v5068 = vunpack.c.l.b16 %v4640
  %v5069 = vunpack.c.h.b16 %v4640
  %v5070 = vunpack.c.l.b16 %v4641
  %v5071 = vunpack.c.h.b16 %v4641
  %v5072 = vunpack.c.l.b16 %v4642
  %v5073 = vunpack.c.h.b16 %v4642
  %v5074 = vunpack.c.l.b16 %v4643
  %v5075 = vunpack.c.h.b16 %v4643
  %v5076 = vunpack.c.l.b16 %v4644
  %v5077 = vunpack.c.h.b16 %v4644
  %v5078 = vunpack.c.l.b16 %v4645
  %v5079 = vunpack.c.h.b16 %v4645
  %v5080 = vunpack.c.l.b16 %v4646
  %v5081 = vunpack.c.h.b16 %v4646
  %v5082 = vunpack.c.l.b16 %v4647
  %v5083 = vunpack.c.h.b16 %v4647
  %v5084 = vunpack.c.l.b16 %v4648
  %v5085 = vunpack.c.h.b16 %v4648
  %v5086 = vunpack.c.l.b16 %v4649
  %v5087 = vunpack.c.h.b16 %v4649
  %v5088 = vunpack.c.l.b16 %v4650
  %v5089 = vunpack.c.h.b16 %v4650
  %v5090 = vunpack.c.l.b16 %v4651
  %v5091 = vunpack.c.h.b16 %v4651
  %v5092 = vunpack.c.l.b16 %v4652
  %v5093 = vunpack.c.h.b16 %v4652
  %v5094 = vunpack.c.l.b16 %v4653
  %v5095 = vunpack.c.h.b16 %v4653
  %v5096 = vunpack.c.l.b16 %v4654
  %v5097 = vunpack.c.h.b16 %v4654
  %v5098 = vunpack.c.l.b16 %v4655
  %v5099 = vunpack.c.h.b16 %v4655
  %v5100 = vunpack.c.l.b16 %v4656
  %v5101 = vunpack.c.h.b16 %v4656
  %v5102 = vunpack.c.l.b16 %v4657
  %v5103 = vunpack.c.h.b16 %v4657
  %v5104 = vunpack.c.l.b16 %v4658
  %v5105 = vunpack.c.h.b16 %v4658
  %v5106 = vunpack.c.l.b16 %v4659
  %v5107 = vunpack.c.h.b16 %v4659
  %v5108 = vunpack.c.l.b16 %v4660
  %v5109 = vunpack.c.h.b16 %v4660
  %v5110 = vunpack.c.l.b16 %v4661
  %v5111 = vunpack.c.h.b16 %v4661
  %v5112 = vunpack.c.l.b16 %v4662
  %v5113 = vunpack.c.h.b16 %v4662
  %v5114 = vunpack.c.l.b16 %v4663
  %v5115 = vunpack.c.h.b16 %v4663
  %v5116 = vunpack.c.l.b16 %v4664
  %v5117 = vunpack.c.h.b16 %v4664
  %v5118 = vunpack.c.l.b16 %v4665
  %v5119 = vunpack.c.h.b16 %v4665
  %v5120 = vunpack.c.l.b16 %v4666
  %v5121 = vunpack.c.h.b16 %v4666
  %v5122 = vunpack.c.l.b16 %v4667
  %v5123 = vunpack.c.h.b16 %v4667
  %v5124 = vunpack.c.l.b16 %v4668
  %v5125 = vunpack.c.h.b16 %v4668
  %v5126 = vunpack.c.l.b16 %v4669
  %v5127 = vunpack.c.h.b16 %v4669
  %v5128 = vunpack.c.l.b16 %v4670
  %v5129 = vunpack.c.h.b16 %v4670
  %v5130 = vunpack.c.l.b16 %v4671
  %v5131 = vunpack.c.h.b16 %v4671
  %v5132 = vunpack.c.l.b16 %v4672
  %v5133 = vunpack.c.h.b16 %v4672
  %v5134 = vunpack.c.l.b16 %v4673
  %v5135 = vunpack.c.h.b16 %v4673
  %v5136 = vunpack.c.l.b16 %v4674
  %v5137 = vunpack.c.h.b16 %v4674
  %v5138 = vunpack.c.l.b16 %v4675
  %v5139 = vunpack.c.h.b16 %v4675
  %v5140 = vunpack.c.l.b16 %v4676
  %v5141 = vunpack.c.h.b16 %v4676
  %v5142 = vunpack.c.l.b16 %v4677
  %v5143 = vunpack.c.h.b16 %v4677
  %v5144 = vunpack.c.l.b16 %v4678
  %v5145 = vunpack.c.h.b16 %v4678
  %v5146 = vunpack.c.l.b16 %v4679
  %v5147 = vunpack.c.h.b16 %v4679
  %v5148 = vunpack.c.l.b16 %v4680
  %v5149 = vunpack.c.h.b16 %v4680
  %v5150 = vunpack.c.l.b16 %v4681
  %v5151 = vunpack.c.h.b16 %v4681
  %v5152 = vunpack.c.l.b16 %v4682
  %v5153 = vunpack.c.h.b16 %v4682
  %v5154 = vunpack.c.l.b16 %v4683
  %v5155 = vunpack.c.h.b16 %v4683
  %v5156 = vunpack.c.l.b16 %v4684
  %v5157 = vunpack.c.h.b16 %v4684
  %v5158 = vunpack.c.l.b16 %v4685
  %v5159 = vunpack.c.h.b16 %v4685
  %v5160 = vunpack.c.l.b16 %v4686
  %v5161 = vunpack.c.h.b16 %v4686
  %v5162 = vunpack.c.l.b16 %v4687
  %v5163 = vunpack.c.h.b16 %v4687
  %v5164 = vunpack.c.l.b16 %v4688
  %v5165 = vunpack.c.h.b16 %v4688
  %v5166 = vunpack.c.l.b16 %v4689
  %v5167 = vunpack.c.h.b16 %v4689
  %v5168 = vunpack.c.l.b16 %v4690
  %v5169 = vunpack.c.h.b16 %v4690
  %v5170 = vunpack.c.l.b16 %v4691
  %v5171 = vunpack.c.h.b16 %v4691
  %v5172 = vunpack.c.l.b16 %v4692
  %v5173 = vunpack.c.h.b16 %v4692
  %v5174 = vunpack.c.l.b16 %v4693
  %v5175 = vunpack.c.h.b16 %v4693
  %v5176 = vunpack.c.l.b16 %v4694
  %v5177 = vunpack.c.h.b16 %v4694
  %v5178 = vunpack.c.l.b16 %v4695
  %v5179 = vunpack.c.h.b16 %v4695
  %v5180 = vunpack.c.l.b16 %v4696
  %v5181 = vunpack.c.h.b16 %v4696
  %v5182 = vunpack.c.l.b16 %v4697
  %v5183 = vunpack.c.h.b16 %v4697
  %v5184 = vunpack.c.l.b16 %v4698
  %v5185 = vunpack.c.h.b16 %v4698
  %v5186 = vunpack.c.l.b16 %v4699
  %v5187 = vunpack.c.h.b16 %v4699
  %v5188 = vunpack.c.l.b16 %v4700
  %v5189 = vunpack.c.h.b16 %v4700
  %v5190 = vunpack.c.l.b16 %v4701
  %v5191 = vunpack.c.h.b16 %v4701
  %v5192 = vunpack.c.l.b16 %v4702
  %v5193 = vunpack.c.h.b16 %v4702
  %v5194 = vunpack.c.l.b16 %v4703
  %v5195 = vunpack.c.h.b16 %v4703
  %v5196 = vunpack.c.l.b16 %v4704
  %v5197 = vunpack.c.h.b16 %v4704
  %v5198 = vunpack.c.l.b16 %v4705
  %v5199 = vunpack.c.h.b16 %v4705
  %v5200 = vunpack.c.l.b16 %v4706
  %v5201 = vunpack.c.h.b16 %v4706
  %v5202 = vunpack.c.l.b16 %v4707
  %v5203 = vunpack.c.h.b16 %v4707
  %v5204 = vunpack.c.l.b16 %v4708
  %v5205 = vunpack.c.h.b16 %v4708
  %v5206 = vunpack.c.l.b16 %v4709
  %v5207 = vunpack.c.h.b16 %v4709
  %v5208 = vunpack.c.l.b16 %v4710
  %v5209 = vunpack.c.h.b16 %v4710
  %v5210 = vunpack.c.l.b16 %v4711
  %v5211 = vunpack.c.h.b16 %v4711
  %v5212 = vunpack.c.l.b16 %v4712
  %v5213 = vunpack.c.h.b16 %v4712
  %v5214 = vunpack.c.l.b16 %v4713
  %v5215 = vunpack.c.h.b16 %v4713
  %v5216 = vunpack.c.l.b16 %v4714
  %v5217 = vunpack.c.h.b16 %v4714
  %v5218 = vunpack.c.l.b16 %v4715
  %v5219 = vunpack.c.h.b16 %v4715
  %v5220 = vunpack.c.l.b16 %v4716
  %v5221 = vunpack.c.h.b16 %v4716
  %v5222 = vunpack.c.l.b16 %v4717
  %v5223 = vunpack.c.h.b16 %v4717
  %v5224 = vunpack.c.l.b16 %v4718
  %v5225 = vunpack.c.h.b16 %v4718
  %v5226 = vunpack.c.l.b16 %v4719
  %v5227 = vunpack.c.h.b16 %v4719
  %v5228 = vunpack.c.l.b16 %v4720
  %v5229 = vunpack.c.h.b16 %v4720
  %v5230 = vunpack.c.l.b16 %v4721
  %v5231 = vunpack.c.h.b16 %v4721
  %v5232 = vunpack.c.l.b16 %v4722
  %v5233 = vunpack.c.h.b16 %v4722
  %v5234 = vunpack.c.l.b16 %v4723
  %v5235 = vunpack.c.h.b16 %v4723
  %v5236 = vunpack.c.l.b16 %v4724
  %v5237 = vunpack.c.h.b16 %v4724
  %v5238 = vunpack.c.l.b16 %v4725
  %v5239 = vunpack.c.h.b16 %v4725
  %v5240 = vunpack.c.l.b16 %v4726
  %v5241 = vunpack.c.h.b16 %v4726
  %v5242 = vunpack.c.l.b16 %v4727
  %v5243 = vunpack.c.h.b16 %v4727
  %v5244 = vunpack.c.l.b16 %v4728
  %v5245 = vunpack.c.h.b16 %v4728
  %v5246 = vunpack.c.l.b16 %v4729
  %v5247 = vunpack.c.h.b16 %v4729
  %v5248 = vunpack.c.l.b16 %v4730
  %v5249 = vunpack.c.h.b16 %v4730
  %v5250 = vunpack.c.l.b16 %v4731
  %v5251 = vunpack.c.h.b16 %v4731
  %v5252 = vunpack.c.l.b16 %v4732
  %v5253 = vunpack.c.h.b16 %v4732
  %v5254 = vunpack.c.l.b16 %v4733
  %v5255 = vunpack.c.h.b16 %v4733
  %v5256 = vunpack.c.l.b16 %v4734
  %v5257 = vunpack.c.h.b16 %v4734
  %v5258 = vunpack.c.l.b16 %v4735
  %v5259 = vunpack.c.h.b16 %v4735
  %v5260 = vunpack.c.l.b16 %v4736
  %v5261 = vunpack.c.h.b16 %v4736
  %v5262 = vunpack.c.l.b16 %v4737
  %v5263 = vunpack.c.h.b16 %v4737
  %v5264 = vunpack.c.l.b16 %v4738
  %v5265 = vunpack.c.h.b16 %v4738
  %v5266 = vunpack.c.l.b16 %v4739
  %v5267 = vunpack.c.h.b16 %v4739
  %v5268 = vunpack.c.l.b16 %v4740
  %v5269 = vunpack.c.h.b16 %v4740
  %v5270 = vunpack.c.l.b16 %v4741
  %v5271 = vunpack.c.h.b16 %v4741
  %v5272 = vunpack.c.l.b16 %v4742
  %v5273 = vunpack.c.h.b16 %v4742
  %v5274 = vunpack.c.l.b16 %v4743
  %v5275 = vunpack.c.h.b16 %v4743
  %v5276 = vunpack.c.l.b16 %v4744
  %v5277 = vunpack.c.h.b16 %v4744
  %v5278 = vunpack.c.l.b16 %v4745
  %v5279 = vunpack.c.h.b16 %v4745
  %v5280 = vunpack.c.l.b16 %v4746
  %v5281 = vunpack.c.h.b16 %v4746
  %v5282 = vunpack.c.l.b16 %v4747
  %v5283 = vunpack.c.h.b16 %v4747
  %v5284 = vunpack.c.l.b16 %v4748
  %v5285 = vunpack.c.h.b16 %v4748
  %v5286 = vunpack.c.l.b16 %v4749
  %v5287 = vunpack.c.h.b16 %v4749
  %v5288 = vunpack.c.l.b16 %v4750
  %v5289 = vunpack.c.h.b16 %v4750
  %v5290 = vunpack.c.l.b16 %v4751
  %v5291 = vunpack.c.h.b16 %v4751
  %v5292 = vunpack.c.l.b16 %v4752
  %v5293 = vunpack.c.h.b16 %v4752
  %v5294 = vunpack.c.l.b16 %v4753
  %v5295 = vunpack.c.h.b16 %v4753
  %v5296 = vunpack.c.l.b16 %v4754
  %v5297 = vunpack.c.h.b16 %v4754
  %v5298 = vunpack.c.l.b16 %v4755
  %v5299 = vunpack.c.h.b16 %v4755
  %v5300 = vunpack.c.l.b16 %v4756
  %v5301 = vunpack.c.h.b16 %v4756
  %v5302 = vunpack.c.l.b16 %v4757
  %v5303 = vunpack.c.h.b16 %v4757
  %v5304 = vunpack.c.l.b16 %v4758
  %v5305 = vunpack.c.h.b16 %v4758
  %v5306 = vunpack.c.l.b16 %v4759
  %v5307 = vunpack.c.h.b16 %v4759
  %v5308 = vunpack.c.l.b16 %v4760
  %v5309 = vunpack.c.h.b16 %v4760
  %v5310 = vunpack.c.l.b16 %v4761
  %v5311 = vunpack.c.h.b16 %v4761
  %v5312 = vunpack.c.l.b16 %v4762
  %v5313 = vunpack.c.h.b16 %v4762
  %v5314 = vunpack.c.l.b16 %v4763
  %v5315 = vunpack.c.h.b16 %v4763
  %v5316 = vunpack.c.l.b16 %v4764
  %v5317 = vunpack.c.h.b16 %v4764
  %v5318 = vunpack.c.l.b16 %v4765
  %v5319 = vunpack.c.h.b16 %v4765
  %v5320 = vunpack.c.l.b16 %v4766
  %v5321 = vunpack.c.h.b16 %v4766
  %v5322 = vunpack.c.l.b16 %v4767
  %v5323 = vunpack.c.h.b16 %v4767
  %v5324 = vunpack.c.l.b16 %v4768
  %v5325 = vunpack.c.h.b16 %v4768
  %v5326 = vunpack.c.l.b16 %v4769
  %v5327 = vunpack.c.h.b16 %v4769
  %v5328 = vunpack.c.l.b16 %v4770
  %v5329 = vunpack.c.h.b16 %v4770
  %v5330 = vunpack.c.l.b16 %v4771
  %v5331 = vunpack.c.h.b16 %v4771
  %v5332 = vunpack.c.l.b16 %v4772
  %v5333 = vunpack.c.h.b16 %v4772
  %v5334 = vunpack.c.l.b16 %v4773
  %v5335 = vunpack.c.h.b16 %v4773
  %v5336 = vunpack.c.l.b16 %v4774
  %v5337 = vunpack.c.h.b16 %v4774
  %v5338 = vunpack.c.l.b16 %v4775
  %v5339 = vunpack.c.h.b16 %v4775
  %v5340 = vunpack.c.l.b16 %v4776
  %v5341 = vunpack.c.h.b16 %v4776
  %v5342 = vunpack.c.l.b16 %v4777
  %v5343 = vunpack.c.h.b16 %v4777
  %v5344 = vunpack.c.l.b16 %v4778
  %v5345 = vunpack.c.h.b16 %v4778
  %v5346 = vunpack.c.l.b16 %v4779
  %v5347 = vunpack.c.h.b16 %v4779
  %v5348 = vunpack.c.l.b16 %v4780
  %v5349 = vunpack.c.h.b16 %v4780
  %v5350 = vunpack.c.l.b16 %v4781
  %v5351 = vunpack.c.h.b16 %v4781
  %v5352 = vunpack.c.l.b16 %v4782
  %v5353 = vunpack.c.h.b16 %v4782
  %v5354 = vunpack.c.l.b16 %v4783
  %v5355 = vunpack.c.h.b16 %v4783
  %v5356 = vunpack.c.l.b16 %v4784
  %v5357 = vunpack.c.h.b16 %v4784
  %v5358 = vunpack.c.l.b16 %v4785
  %v5359 = vunpack.c.h.b16 %v4785
  %v5360 = vunpack.c.l.b16 %v4786
  %v5361 = vunpack.c.h.b16 %v4786
  %v5362 = vunpack.c.l.b16 %v4787
  %v5363 = vunpack.c.h.b16 %v4787
  %v5364 = vunpack.c.l.b16 %v4788
  %v5365 = vunpack.c.h.b16 %v4788
  %v5366 = vunpack.c.l.b16 %v4789
  %v5367 = vunpack.c.h.b16 %v4789
  %v5368 = vunpack.c.l.b16 %v4790
  %v5369 = vunpack.c.h.b16 %v4790
  %v5370 = vunpack.c.l.b16 %v4791
  %v5371 = vunpack.c.h.b16 %v4791
  %v5372 = vunpack.c.l.b16 %v4792
  %v5373 = vunpack.c.h.b16 %v4792
  %v5374 = vunpack.c.l.b16 %v4793
  %v5375 = vunpack.c.h.b16 %v4793
  %v5376 = vunpack.c.l.b16 %v4794
  %v5377 = vunpack.c.h.b16 %v4794
  %v5378 = vunpack.c.l.b16 %v4795
  %v5379 = vunpack.c.h.b16 %v4795
  %v5380 = vunpack.c.l.b16 %v4796
  %v5381 = vunpack.c.h.b16 %v4796
  %v5382 = vunpack.c.l.b16 %v4797
  %v5383 = vunpack.c.h.b16 %v4797
  %v5384 = vunpack.c.l.b16 %v4798
  %v5385 = vunpack.c.h.b16 %v4798
  %v5386 = vunpack.c.l.b16 %v4799
  %v5387 = vunpack.c.h.b16 %v4799
  %v5388 = vpack.c.b16 %v5000, %v4996
  %v5389 = vpack.c.b16 %v5001, %v4997
  %v5390 = vpack.c.b16 %v5002, %v4998
  %v5391 = vpack.c.b16 %v5003, %v4999
  %v5392 = vpack.c.b16 %v5008, %v5004
  %v5393 = vpack.c.b16 %v5009, %v5005
  %v5394 = vpack.c.b16 %v5010, %v5006
  %v5395 = vpack.c.b16 %v5011, %v5007
  %v5396 = vpack.c.b16 %v5016, %v5012
  %v5397 = vpack.c.b16 %v5017, %v5013
  %v5398 = vpack.c.b16 %v5018, %v5014
  %v5399 = vpack.c.b16 %v5019, %v5015
  %v5400 = vpack.c.b16 %v5024, %v5020
  %v5401 = vpack.c.b16 %v5025, %v5021
  %v5402 = vpack.c.b16 %v5026, %v5022
  %v5403 = vpack.c.b16 %v5027, %v5023
  %v5404 = vpack.c.b16 %v5032, %v5028
  %v5405 = vpack.c.b16 %v5033, %v5029
  %v5406 = vpack.c.b16 %v5034, %v5030
  %v5407 = vpack.c.b16 %v5035, %v5031
  %v5408 = vpack.c.b16 %v5040, %v5036
  %v5409 = vpack.c.b16 %v5041, %v5037
  %v5410 = vpack.c.b16 %v5042, %v5038
  %v5411 = vpack.c.b16 %v5043, %v5039
  %v5412 = vpack.c.b16 %v5048, %v5044
  %v5413 = vpack.c.b16 %v5049, %v5045
  %v5414 = vpack.c.b16 %v5050, %v5046
  %v5415 = vpack.c.b16 %v5051, %v5047
  %v5416 = vpack.c.b16 %v5056, %v5052
  %v5417 = vpack.c.b16 %v5057, %v5053
  %v5418 = vpack.c.b16 %v5058, %v5054
  %v5419 = vpack.c.b16 %v5059, %v5055
  %v5420 = vpack.c.b16 %v5064, %v5060
  %v5421 = vpack.c.b16 %v5065, %v5061
  %v5422 = vpack.c.b16 %v5066, %v5062
  %v5423 = vpack.c.b16 %v5067, %v5063
  %v5424 = vpack.c.b16 %v5072, %v5068
  %v5425 = vpack.c.b16 %v5073, %v5069
  %v5426 = vpack.c.b16 %v5074, %v5070
  %v5427 = vpack.c.b16 %v5075, %v5071
  %v5428 = vpack.c.b16 %v5080, %v5076
  %v5429 = vpack.c.b16 %v5081, %v5077
  %v5430 = vpack.c.b16 %v5082, %v5078
  %v5431 = vpack.c.b16 %v5083, %v5079
  %v5432 = vpack.c.b16 %v5088, %v5084
  %v5433 = vpack.c.b16 %v5089, %v5085
  %v5434 = vpack.c.b16 %v5090, %v5086
  %v5435 = vpack.c.b16 %v5091, %v5087
  %v5436 = vpack.c.b16 %v5096, %v5092
  %v5437 = vpack.c.b16 %v5097, %v5093
  %v5438 = vpack.c.b16 %v5098, %v5094
  %v5439 = vpack.c.b16 %v5099, %v5095
  %v5440 = vpack.c.b16 %v5104, %v5100
  %v5441 = vpack.c.b16 %v5105, %v5101
  %v5442 = vpack.c.b16 %v5106, %v5102
  %v5443 = vpack.c.b16 %v5107, %v5103
  %v5444 = vpack.c.b16 %v5112, %v5108
  %v5445 = vpack.c.b16 %v5113, %v5109
  %v5446 = vpack.c.b16 %v5114, %v5110
  %v5447 = vpack.c.b16 %v5115, %v5111
  %v5448 = vpack.c.b16 %v5120, %v5116
  %v5449 = vpack.c.b16 %v5121, %v5117
  %v5450 = vpack.c.b16 %v5122, %v5118
  %v5451 = vpack.c.b16 %v5123, %v5119
  %v5452 = vpack.c.b16 %v5128, %v5124
  %v5453 = vpack.c.b16 %v5129, %v5125
  %v5454 = vpack.c.b16 %v5130, %v5126
  %v5455 = vpack.c.b16 %v5131, %v5127
  %v5456 = vpack.c.b16 %v5136, %v5132
  %v5457 = vpack.c.b16 %v5137, %v5133
  %v5458 = vpack.c.b16 %v5138, %v5134
  %v5459 = vpack.c.b16 %v5139, %v5135
  %v5460 = vpack.c.b16 %v5144, %v5140
  %v5461 = vpack.c.b16 %v5145, %v5141
  %v5462 = vpack.c.b16 %v5146, %v5142
  %v5463 = vpack.c.b16 %v5147, %v5143
  %v5464 = vpack.c.b16 %v5152, %v5148
  %v5465 = vpack.c.b16 %v5153, %v5149
  %v5466 = vpack.c.b16 %v5154, %v5150
  %v5467 = vpack.c.b16 %v5155, %v5151
  %v5468 = vpack.c.b16 %v5160, %v5156
  %v5469 = vpack.c.b16 %v5161, %v5157
  %v5470 = vpack.c.b16 %v5162, %v5158
  %v5471 = vpack.c.b16 %v5163, %v5159
  %v5472 = vpack.c.b16 %v5168, %v5164
  %v5473 = vpack.c.b16 %v5169, %v5165
  %v5474 = vpack.c.b16 %v5170, %v5166
  %v5475 = vpack.c.b16 %v5171, %v5167
  %v5476 = vpack.c.b16 %v5176, %v5172
  %v5477 = vpack.c.b16 %v5177, %v5173
  %v5478 = vpack.c.b16 %v5178, %v5174
  %v5479 = vpack.c.b16 %v5179, %v5175
  %v5480 = vpack.c.b16 %v5184, %v5180
  %v5481 = vpack.c.b16 %v5185, %v5181
  %v5482 = vpack.c.b16 %v5186, %v5182
  %v5483 = vpack.c.b16 %v5187, %v5183
  %v5484 = vpack.c.b16 %v5192, %v5188
  %v5485 = vpack.c.b16 %v5193, %v5189
  %v5486 = vpack.c.b16 %v5194, %v5190
  %v5487 = vpack.c.b16 %v5195, %v5191
  %v5488 = vpack.c.b16 %v5200, %v5196
  %v5489 = vpack.c.b16 %v5201, %v5197
  %v5490 = vpack.c.b16 %v5202, %v5198
  %v5491 = vpack.c.b16 %v5203, %v5199
  %v5492 = vpack.c.b16 %v5208, %v5204
  %v5493 = vpack.c.b16 %v5209, %v5205
  %v5494 = vpack.c.b16 %v5210, %v5206
  %v5495 = vpack.c.b16 %v5211, %v5207
  %v5496 = vpack.c.b16 %v5216, %v5212
  %v5497 = vpack.c.b16 %v5217, %v5213
  %v5498 = vpack.c.b16 %v5218, %v5214
  %v5499 = vpack.c.b16 %v5219, %v5215
  %v5500 = vpack.c.b16 %v5224, %v5220
  %v5501 = vpack.c.b16 %v5225, %v5221
  %v5502 = vpack.c.b16 %v5226, %v5222
  %v5503 = vpack.c.b16 %v5227, %v5223
  %v5504 = vpack.c.b16 %v5232, %v5228
  %v5505 = vpack.c.b16 %v5233, %v5229
  %v5506 = vpack.c.b16 %v5234, %v5230
  %v5507 = vpack.c.b16 %v5235, %v5231
  %v5508 = vpack.c.b16 %v5240, %v5236
  %v5509 = vpack.c.b16 %v5241, %v5237
  %v5510 = vpack.c.b16 %v5242, %v5238
  %v5511 = vpack.c.b16 %v5243, %v5239
  %v5512 = vpack.c.b16 %v5248, %v5244
  %v5513 = vpack.c.b16 %v5249, %v5245
  %v5514 = vpack.c.b16 %v5250, %v5246
  %v5515 = vpack.c.b16 %v5251, %v5247
  %v5516 = vpack.c.b16 %v5256, %v5252
  %v5517 = vpack.c.b16 %v5257, %v5253
  %v5518 = vpack.c.b16 %v5258, %v5254
  %v5519 = vpack.c.b16 %v5259, %v5255
  %v5520 = vpack.c.b16 %v5264, %v5260
  %v5521 = vpack.c.b16 %v5265, %v5261
  %v5522 = vpack.c.b16 %v5266, %v5262
  %v5523 = vpack.c.b16 %v5267, %v5263
  %v5524 = vpack.c.b16 %v5272, %v5268
  %v5525 = vpack.c.b16 %v5273, %v5269
  %v5526 = vpack.c.b16 %v5274, %v5270
  %v5527 = vpack.c.b16 %v5275, %v5271
  %v5528 = vpack.c.b16 %v5280, %v5276
  %v5529 = vpack.c.b16 %v5281, %v5277
  %v5530 = vpack.c.b16 %v5282, %v5278
  %v5531 = vpack.c.b16 %v5283, %v5279
  %v5532 = vpack.c.b16 %v5288, %v5284
  %v5533 = vpack.c.b16 %v5289, %v5285
  %v5534 = vpack.c.b16 %v5290, %v5286
  %v5535 = vpack.c.b16 %v5291, %v5287
  %v5536 = vpack.c.b16 %v5296, %v5292
  %v5537 = vpack.c.b16 %v5297, %v5293
  %v5538 = vpack.c.b16 %v5298, %v5294
  %v5539 = vpack.c.b16 %v5299, %v5295
  %v5540 = vpack.c.b16 %v5304, %v5300
  %v5541 = vpack.c.b16 %v5305, %v5301
  %v5542 = vpack.c.b16 %v5306, %v5302
  %v5543 = vpack.c.b16 %v5307, %v5303
  %v5544 = vpack.c.b16 %v5312, %v5308
  %v5545 = vpack.c.b16 %v5313, %v5309
  %v5546 = vpack.c.b16 %v5314, %v5310
  %v5547 = vpack.c.b16 %v5315, %v5311
  %v5548 = vpack.c.b16 %v5320, %v5316
  %v5549 = vpack.c.b16 %v5321, %v5317
  %v5550 = vpack.c.b16 %v5322, %v5318
  %v5551 = vpack.c.b16 %v5323, %v5319
  %v5552 = vpack.c.b16 %v5328, %v5324
  %v5553 = vpack.c.b16 %v5329, %v5325
  %v5554 = vpack.c.b16 %v5330, %v5326
  %v5555 = vpack.c.b16 %v5331, %v5327
  %v5556 = vpack.c.b16 %v5336, %v5332
  %v5557 = vpack.c.b16 %v5337, %v5333
  %v5558 = vpack.c.b16 %v5338, %v5334
  %v5559 = vpack.c.b16 %v5339, %v5335
  %v5560 = vpack.c.b16 %v5344, %v5340
  %v5561 = vpack.c.b16 %v5345, %v5341
  %v5562 = vpack.c.b16 %v5346, %v5342
  %v5563 = vpack.c.b16 %v5347, %v5343
  %v5564 = vpack.c.b16 %v5352, %v5348
  %v5565 = vpack.c.b16 %v5353, %v5349
  %v5566 = vpack.c.b16 %v5354, %v5350
  %v5567 = vpack.c.b16 %v5355, %v5351
  %v5568 = vpack.c.b16 %v5360, %v5356
  %v5569 = vpack.c.b16 %v5361, %v5357
  %v5570 = vpack.c.b16 %v5362, %v5358
  %v5571 = vpack.c.b16 %v5363, %v5359
  %v5572 = vpack.c.b16 %v5368, %v5364
  %v5573 = vpack.c.b16 %v5369, %v5365
  %v5574 = vpack.c.b16 %v5370, %v5366
  %v5575 = vpack.c.b16 %v5371, %v5367
  %v5576 = vpack.c.b16 %v5376, %v5372
  %v5577 = vpack.c.b16 %v5377, %v5373
  %v5578 = vpack.c.b16 %v5378, %v5374
  %v5579 = vpack.c.b16 %v5379, %v5375
  %v5580 = vpack.c.b16 %v5384, %v5380
  %v5581 = vpack.c.b16 %v5385, %v5381
  %v5582 = vpack.c.b16 %v5386, %v5382
  %v5583 = vpack.c.b16 %v5387, %v5383
  %5780 = vmatprep.subr.bf16.mxu0 %v5389
  %5781 = vmatpush1.bf16.msra.mxu0 %v5388
  %5782 = vmatprep.subr.bf16.mxu0 %v5393
  %5783 = vmatpush1.bf16.msra.mxu0 %v5392
  %5784 = vmatprep.subr.bf16.mxu0 %v5397
  %5785 = vmatpush1.bf16.msra.mxu0 %v5396
  %5786 = vmatprep.subr.bf16.mxu0 %v5401
  %5787 = vmatpush1.bf16.msra.mxu0 %v5400
  %5788 = vmatprep.subr.bf16.mxu0 %v5405
  %5789 = vmatpush1.bf16.msra.mxu0 %v5404
  %5790 = vmatprep.subr.bf16.mxu0 %v5409
  %5791 = vmatpush1.bf16.msra.mxu0 %v5408
  %5792 = vmatprep.subr.bf16.mxu0 %v5413
  %5793 = vmatpush1.bf16.msra.mxu0 %v5412
  %5794 = vmatprep.subr.bf16.mxu0 %v5417
  %5795 = vmatpush1.bf16.msra.mxu0 %v5416
  %5796 = vmatprep.subr.bf16.mxu0 %v5421
  %5797 = vmatpush1.bf16.msra.mxu0 %v5420
  %5798 = vmatprep.subr.bf16.mxu0 %v5425
  %5799 = vmatpush1.bf16.msra.mxu0 %v5424
  %5800 = vmatprep.subr.bf16.mxu0 %v5429
  %5801 = vmatpush1.bf16.msra.mxu0 %v5428
  %5802 = vmatprep.subr.bf16.mxu0 %v5433
  %5803 = vmatpush1.bf16.msra.mxu0 %v5432
  %5804 = vmatprep.subr.bf16.mxu0 %v5437
  %5805 = vmatpush1.bf16.msra.mxu0 %v5436
  %5806 = vmatprep.subr.bf16.mxu0 %v5441
  %5807 = vmatpush1.bf16.msra.mxu0 %v5440
  %5808 = vmatprep.subr.bf16.mxu0 %v5445
  %5809 = vmatpush1.bf16.msra.mxu0 %v5444
  %5810 = vmatprep.subr.bf16.mxu0 %v5449
  %5811 = vmatpush1.bf16.msra.mxu0 %v5448
  %5812 = vmatprep.mubr.bf16.mxu0 %v268
  %5813 = vmatmul.mubr.bf16.gmra.mrb[0].mxu0 %v267
  %v5814 = vpop.f32.mrb[0].mxu0
  %v5815 = vadd.f32 0.0, %v5814
  %v5816 = vpop.f32.mrb[0].mxu0
  %v5817 = vadd.f32 0.0, %v5816
  %v5818 = vpop.f32.mrb[0].mxu0
  %v5819 = vpop.f32.mrb[0].mxu0
  %5820 = vdwg.mxu0
  %5821 = vmatprep.subr.bf16.mxu0 %v5453
  %5822 = vmatpush1.bf16.msra.mxu0 %v5452
  %5823 = vmatprep.subr.bf16.mxu0 %v5457
  %5824 = vmatpush1.bf16.msra.mxu0 %v5456
  %5825 = vmatprep.subr.bf16.mxu0 %v5461
  %5826 = vmatpush1.bf16.msra.mxu0 %v5460
  %5827 = vmatprep.subr.bf16.mxu0 %v5465
  %5828 = vmatpush1.bf16.msra.mxu0 %v5464
  %5829 = vmatprep.subr.bf16.mxu0 %v5469
  %5830 = vmatpush1.bf16.msra.mxu0 %v5468
  %5831 = vmatprep.subr.bf16.mxu0 %v5473
  %5832 = vmatpush1.bf16.msra.mxu0 %v5472
  %5833 = vmatprep.subr.bf16.mxu0 %v5477
  %5834 = vmatpush1.bf16.msra.mxu0 %v5476
  %5835 = vmatprep.subr.bf16.mxu0 %v5481
  %5836 = vmatpush1.bf16.msra.mxu0 %v5480
  %5837 = vmatprep.subr.bf16.mxu0 %v5485
  %5838 = vmatpush1.bf16.msra.mxu0 %v5484
  %5839 = vmatprep.subr.bf16.mxu0 %v5489
  %5840 = vmatpush1.bf16.msra.mxu0 %v5488
  %5841 = vmatprep.subr.bf16.mxu0 %v5493
  %5842 = vmatpush1.bf16.msra.mxu0 %v5492
  %5843 = vmatprep.subr.bf16.mxu0 %v5497
  %5844 = vmatpush1.bf16.msra.mxu0 %v5496
  %5845 = vmatprep.subr.bf16.mxu0 %v5501
  %5846 = vmatpush1.bf16.msra.mxu0 %v5500
  %5847 = vmatprep.subr.bf16.mxu0 %v5505
  %5848 = vmatpush1.bf16.msra.mxu0 %v5504
  %5849 = vmatprep.subr.bf16.mxu0 %v5509
  %5850 = vmatpush1.bf16.msra.mxu0 %v5508
  %5851 = vmatprep.subr.bf16.mxu0 %v5513
  %5852 = vmatpush1.bf16.msra.mxu0 %v5512
  %5853 = vmatprep.mubr.bf16.mxu0 %v270
  %5854 = vmatmul.mubr.bf16.gmra.mrb[0].mxu0 %v269
  %v5855 = vpop.f32.mrb[0].mxu0
  %v5856 = vadd.f32 %v5815, %v5855
  %v5857 = vpop.f32.mrb[0].mxu0
  %v5858 = vadd.f32 %v5817, %v5857
  %v5859 = vpop.f32.mrb[0].mxu0
  %v5860 = vpop.f32.mrb[0].mxu0
  %5861 = vdwg.mxu0
  %5862 = vmatprep.subr.bf16.mxu0 %v5517
  %5863 = vmatpush1.bf16.msra.mxu0 %v5516
  %5864 = vmatprep.subr.bf16.mxu0 %v5521
  %5865 = vmatpush1.bf16.msra.mxu0 %v5520
  %5866 = vmatprep.subr.bf16.mxu0 %v5525
  %5867 = vmatpush1.bf16.msra.mxu0 %v5524
  %5868 = vmatprep.subr.bf16.mxu0 %v5529
  %5869 = vmatpush1.bf16.msra.mxu0 %v5528
  %5870 = vmatprep.subr.bf16.mxu0 %v5533
  %5871 = vmatpush1.bf16.msra.mxu0 %v5532
  %5872 = vmatprep.subr.bf16.mxu0 %v5537
  %5873 = vmatpush1.bf16.msra.mxu0 %v5536
  %5874 = vmatprep.subr.bf16.mxu0 %v5541
  %5875 = vmatpush1.bf16.msra.mxu0 %v5540
  %5876 = vmatprep.subr.bf16.mxu0 %v5545
  %5877 = vmatpush1.bf16.msra.mxu0 %v5544
  %5878 = vmatprep.subr.bf16.mxu0 %v5549
  %5879 = vmatpush1.bf16.msra.mxu0 %v5548
  %5880 = vmatprep.subr.bf16.mxu0 %v5553
  %5881 = vmatpush1.bf16.msra.mxu0 %v5552
  %5882 = vmatprep.subr.bf16.mxu0 %v5557
  %5883 = vmatpush1.bf16.msra.mxu0 %v5556
  %5884 = vmatprep.subr.bf16.mxu0 %v5561
  %5885 = vmatpush1.bf16.msra.mxu0 %v5560
  %5886 = vmatprep.subr.bf16.mxu0 %v5565
  %5887 = vmatpush1.bf16.msra.mxu0 %v5564
  %5888 = vmatprep.subr.bf16.mxu0 %v5569
  %5889 = vmatpush1.bf16.msra.mxu0 %v5568
  %5890 = vmatprep.subr.bf16.mxu0 %v5573
  %5891 = vmatpush1.bf16.msra.mxu0 %v5572
  %5892 = vmatprep.subr.bf16.mxu0 %v5577
  %5893 = vmatpush1.bf16.msra.mxu0 %v5576
  %5894 = vmatprep.mubr.bf16.mxu0 %v272
  %5895 = vmatmul.mubr.bf16.gmra.mrb[0].mxu0 %v271
  %v5896 = vpop.f32.mrb[0].mxu0
  %v5897 = vadd.f32 %v5856, %v5896
  %v5898 = vpop.f32.mrb[0].mxu0
  %v5899 = vadd.f32 %v5858, %v5898
  %v5900 = vpop.f32.mrb[0].mxu0
  %v5901 = vpop.f32.mrb[0].mxu0
  %5902 = vdwg.mxu0
  %5903 = vmatprep.subr.bf16.mxu0 %v5581
  %5904 = vmatpush1.bf16.msra.mxu0 %v5580
  %5905 = vmatprep.subr.bf16.mxu0 0
  %5906 = vmatpush1.bf16.msra.mxu0 0
  %5907 = vmatprep.subr.bf16.mxu0 0
  %5908 = vmatpush1.bf16.msra.mxu0 0
  %5909 = vmatprep.subr.bf16.mxu0 0
  %5910 = vmatpush1.bf16.msra.mxu0 0
  %5911 = vmatprep.subr.bf16.mxu0 0
  %5912 = vmatpush1.bf16.msra.mxu0 0
  %5913 = vmatprep.subr.bf16.mxu0 0
  %5914 = vmatpush1.bf16.msra.mxu0 0
  %5915 = vmatprep.subr.bf16.mxu0 0
  %5916 = vmatpush1.bf16.msra.mxu0 0
  %5917 = vmatprep.subr.bf16.mxu0 0
  %5918 = vmatpush1.bf16.msra.mxu0 0
  %5919 = vmatprep.subr.bf16.mxu0 0
  %5920 = vmatpush1.bf16.msra.mxu0 0
  %5921 = vmatprep.subr.bf16.mxu0 0
  %5922 = vmatpush1.bf16.msra.mxu0 0
  %5923 = vmatprep.subr.bf16.mxu0 0
  %5924 = vmatpush1.bf16.msra.mxu0 0
  %5925 = vmatprep.subr.bf16.mxu0 0
  %5926 = vmatpush1.bf16.msra.mxu0 0
  %5927 = vmatprep.subr.bf16.mxu0 0
  %5928 = vmatpush1.bf16.msra.mxu0 0
  %5929 = vmatprep.subr.bf16.mxu0 0
  %5930 = vmatpush1.bf16.msra.mxu0 0
  %5931 = vmatprep.subr.bf16.mxu0 0
  %5932 = vmatpush1.bf16.msra.mxu0 0
  %5933 = vmatprep.subr.bf16.mxu0 0
  %5934 = vmatpush1.bf16.msra.mxu0 0
  %5935 = vmatprep.mubr.bf16.mxu0 0
  %5936 = vmatmul.mubr.bf16.gmra.mrb[0].mxu0 %v1262
  %v5937 = vpop.f32.mrb[0].mxu0
  %v5938 = vadd.f32 %v5897, %v5937
  %v5939 = vpop.f32.mrb[0].mxu0
  %v5940 = vadd.f32 %v5899, %v5939
  %v5941 = vpop.f32.mrb[0].mxu0
  %v5942 = vpop.f32.mrb[0].mxu0
  %5943 = vdwg.mxu0
  %5944 = vmatprep.subr.bf16.mxu0 %v5391
  %5945 = vmatpush1.bf16.msra.mxu0 %v5390
  %5946 = vmatprep.subr.bf16.mxu0 %v5395
  %5947 = vmatpush1.bf16.msra.mxu0 %v5394
  %5948 = vmatprep.subr.bf16.mxu0 %v5399
  %5949 = vmatpush1.bf16.msra.mxu0 %v5398
  %5950 = vmatprep.subr.bf16.mxu0 %v5403
  %5951 = vmatpush1.bf16.msra.mxu0 %v5402
  %5952 = vmatprep.subr.bf16.mxu0 %v5407
  %5953 = vmatpush1.bf16.msra.mxu0 %v5406
  %5954 = vmatprep.subr.bf16.mxu0 %v5411
  %5955 = vmatpush1.bf16.msra.mxu0 %v5410
  %5956 = vmatprep.subr.bf16.mxu0 %v5415
  %5957 = vmatpush1.bf16.msra.mxu0 %v5414
  %5958 = vmatprep.subr.bf16.mxu0 %v5419
  %5959 = vmatpush1.bf16.msra.mxu0 %v5418
  %5960 = vmatprep.subr.bf16.mxu0 %v5423
  %5961 = vmatpush1.bf16.msra.mxu0 %v5422
  %5962 = vmatprep.subr.bf16.mxu0 %v5427
  %5963 = vmatpush1.bf16.msra.mxu0 %v5426
  %5964 = vmatprep.subr.bf16.mxu0 %v5431
  %5965 = vmatpush1.bf16.msra.mxu0 %v5430
  %5966 = vmatprep.subr.bf16.mxu0 %v5435
  %5967 = vmatpush1.bf16.msra.mxu0 %v5434
  %5968 = vmatprep.subr.bf16.mxu0 %v5439
  %5969 = vmatpush1.bf16.msra.mxu0 %v5438
  %5970 = vmatprep.subr.bf16.mxu0 %v5443
  %5971 = vmatpush1.bf16.msra.mxu0 %v5442
  %5972 = vmatprep.subr.bf16.mxu0 %v5447
  %5973 = vmatpush1.bf16.msra.mxu0 %v5446
  %5974 = vmatprep.subr.bf16.mxu0 %v5451
  %5975 = vmatpush1.bf16.msra.mxu0 %v5450
  %5976 = vmatprep.mubr.bf16.mxu0 %v268
  %5977 = vmatmul.mubr.bf16.gmra.mrb[0].mxu0 %v267
  %v5978 = vpop.f32.mrb[0].mxu0
  %v5979 = vadd.f32 0.0, %v5978
  %v5980 = vpop.f32.mrb[0].mxu0
  %v5981 = vadd.f32 0.0, %v5980
  %v5982 = vpop.f32.mrb[0].mxu0
  %v5983 = vpop.f32.mrb[0].mxu0
  %5984 = vdwg.mxu0
  %5985 = vmatprep.subr.bf16.mxu0 %v5455
  %5986 = vmatpush1.bf16.msra.mxu0 %v5454
  %5987 = vmatprep.subr.bf16.mxu0 %v5459
  %5988 = vmatpush1.bf16.msra.mxu0 %v5458
  %5989 = vmatprep.subr.bf16.mxu0 %v5463
  %5990 = vmatpush1.bf16.msra.mxu0 %v5462
  %5991 = vmatprep.subr.bf16.mxu0 %v5467
  %5992 = vmatpush1.bf16.msra.mxu0 %v5466
  %5993 = vmatprep.subr.bf16.mxu0 %v5471
  %5994 = vmatpush1.bf16.msra.mxu0 %v5470
  %5995 = vmatprep.subr.bf16.mxu0 %v5475
  %5996 = vmatpush1.bf16.msra.mxu0 %v5474
  %5997 = vmatprep.subr.bf16.mxu0 %v5479
  %5998 = vmatpush1.bf16.msra.mxu0 %v5478
  %5999 = vmatprep.subr.bf16.mxu0 %v5483
  %6000 = vmatpush1.bf16.msra.mxu0 %v5482
  %6001 = vmatprep.subr.bf16.mxu0 %v5487
  %6002 = vmatpush1.bf16.msra.mxu0 %v5486
  %6003 = vmatprep.subr.bf16.mxu0 %v5491
  %6004 = vmatpush1.bf16.msra.mxu0 %v5490
  %6005 = vmatprep.subr.bf16.mxu0 %v5495
  %6006 = vmatpush1.bf16.msra.mxu0 %v5494
  %6007 = vmatprep.subr.bf16.mxu0 %v5499
  %6008 = vmatpush1.bf16.msra.mxu0 %v5498
  %6009 = vmatprep.subr.bf16.mxu0 %v5503
  %6010 = vmatpush1.bf16.msra.mxu0 %v5502
  %6011 = vmatprep.subr.bf16.mxu0 %v5507
  %6012 = vmatpush1.bf16.msra.mxu0 %v5506
  %6013 = vmatprep.subr.bf16.mxu0 %v5511
  %6014 = vmatpush1.bf16.msra.mxu0 %v5510
  %6015 = vmatprep.subr.bf16.mxu0 %v5515
  %6016 = vmatpush1.bf16.msra.mxu0 %v5514
  %6017 = vmatprep.mubr.bf16.mxu0 %v270
  %6018 = vmatmul.mubr.bf16.gmra.mrb[0].mxu0 %v269
  %v6019 = vpop.f32.mrb[0].mxu0
  %v6020 = vadd.f32 %v5979, %v6019
  %v6021 = vpop.f32.mrb[0].mxu0
  %v6022 = vadd.f32 %v5981, %v6021
  %v6023 = vpop.f32.mrb[0].mxu0
  %v6024 = vpop.f32.mrb[0].mxu0
  %6025 = vdwg.mxu0
  %6026 = vmatprep.subr.bf16.mxu0 %v5519
  %6027 = vmatpush1.bf16.msra.mxu0 %v5518
  %6028 = vmatprep.subr.bf16.mxu0 %v5523
  %6029 = vmatpush1.bf16.msra.mxu0 %v5522
  %6030 = vmatprep.subr.bf16.mxu0 %v5527
  %6031 = vmatpush1.bf16.msra.mxu0 %v5526
  %6032 = vmatprep.subr.bf16.mxu0 %v5531
  %6033 = vmatpush1.bf16.msra.mxu0 %v5530
  %6034 = vmatprep.subr.bf16.mxu0 %v5535
  %6035 = vmatpush1.bf16.msra.mxu0 %v5534
  %6036 = vmatprep.subr.bf16.mxu0 %v5539
  %6037 = vmatpush1.bf16.msra.mxu0 %v5538
  %6038 = vmatprep.subr.bf16.mxu0 %v5543
  %6039 = vmatpush1.bf16.msra.mxu0 %v5542
  %6040 = vmatprep.subr.bf16.mxu0 %v5547
  %6041 = vmatpush1.bf16.msra.mxu0 %v5546
  %6042 = vmatprep.subr.bf16.mxu0 %v5551
  %6043 = vmatpush1.bf16.msra.mxu0 %v5550
  %6044 = vmatprep.subr.bf16.mxu0 %v5555
  %6045 = vmatpush1.bf16.msra.mxu0 %v5554
  %6046 = vmatprep.subr.bf16.mxu0 %v5559
  %6047 = vmatpush1.bf16.msra.mxu0 %v5558
  %6048 = vmatprep.subr.bf16.mxu0 %v5563
  %6049 = vmatpush1.bf16.msra.mxu0 %v5562
  %6050 = vmatprep.subr.bf16.mxu0 %v5567
  %6051 = vmatpush1.bf16.msra.mxu0 %v5566
  %6052 = vmatprep.subr.bf16.mxu0 %v5571
  %6053 = vmatpush1.bf16.msra.mxu0 %v5570
  %6054 = vmatprep.subr.bf16.mxu0 %v5575
  %6055 = vmatpush1.bf16.msra.mxu0 %v5574
  %6056 = vmatprep.subr.bf16.mxu0 %v5579
  %6057 = vmatpush1.bf16.msra.mxu0 %v5578
  %6058 = vmatprep.mubr.bf16.mxu0 %v272
  %6059 = vmatmul.mubr.bf16.gmra.mrb[0].mxu0 %v271
  %v6060 = vpop.f32.mrb[0].mxu0
  %v6061 = vadd.f32 %v6020, %v6060
  %v6062 = vpop.f32.mrb[0].mxu0
  %v6063 = vadd.f32 %v6022, %v6062
  %v6064 = vpop.f32.mrb[0].mxu0
  %v6065 = vpop.f32.mrb[0].mxu0
  %6066 = vdwg.mxu0
  %6067 = vmatprep.subr.bf16.mxu0 %v5583
  %6068 = vmatpush1.bf16.msra.mxu0 %v5582
  %6069 = vmatprep.subr.bf16.mxu0 0
  %6070 = vmatpush1.bf16.msra.mxu0 0
  %6071 = vmatprep.subr.bf16.mxu0 0
  %6072 = vmatpush1.bf16.msra.mxu0 0
  %6073 = vmatprep.subr.bf16.mxu0 0
  %6074 = vmatpush1.bf16.msra.mxu0 0
  %6075 = vmatprep.subr.bf16.mxu0 0
  %6076 = vmatpush1.bf16.msra.mxu0 0
  %6077 = vmatprep.subr.bf16.mxu0 0
  %6078 = vmatpush1.bf16.msra.mxu0 0
  %6079 = vmatprep.subr.bf16.mxu0 0
  %6080 = vmatpush1.bf16.msra.mxu0 0
  %6081 = vmatprep.subr.bf16.mxu0 0
  %6082 = vmatpush1.bf16.msra.mxu0 0
  %6083 = vmatprep.subr.bf16.mxu0 0
  %6084 = vmatpush1.bf16.msra.mxu0 0
  %6085 = vmatprep.subr.bf16.mxu0 0
  %6086 = vmatpush1.bf16.msra.mxu0 0
  %6087 = vmatprep.subr.bf16.mxu0 0
  %6088 = vmatpush1.bf16.msra.mxu0 0
  %6089 = vmatprep.subr.bf16.mxu0 0
  %6090 = vmatpush1.bf16.msra.mxu0 0
  %6091 = vmatprep.subr.bf16.mxu0 0
  %6092 = vmatpush1.bf16.msra.mxu0 0
  %6093 = vmatprep.subr.bf16.mxu0 0
  %6094 = vmatpush1.bf16.msra.mxu0 0
  %6095 = vmatprep.subr.bf16.mxu0 0
  %6096 = vmatpush1.bf16.msra.mxu0 0
  %6097 = vmatprep.subr.bf16.mxu0 0
  %6098 = vmatpush1.bf16.msra.mxu0 0
  %6099 = vmatprep.mubr.bf16.mxu0 0
  %6100 = vmatmul.mubr.bf16.gmra.mrb[0].mxu0 %v1262
  %v6101 = vpop.f32.mrb[0].mxu0
  %v6102 = vadd.f32 %v6061, %v6101
  %v6103 = vpop.f32.mrb[0].mxu0
  %v6104 = vadd.f32 %v6063, %v6103
  %v6105 = vpop.f32.mrb[0].mxu0
  %v6106 = vpop.f32.mrb[0].mxu0
  %6107 = vdwg.mxu0
  %v6108 = vmax.f32 %v4434, %v5938
  %v6109 = vmax.f32 %v4436, %v5940
  %v6110 = vmax.f32 %v4598, %v6102
  %v6111 = vmax.f32 %v4600, %v6104
  %v6112 = vmax.f32 %v3096, %v6108
  %v6113 = vmax.f32 %v3097, %v6109
  %v6114 = vmax.f32 %v3098, %v6110
  %v6115 = vmax.f32 %v3099, %v6111
  %v6116 = vld [vmem:[%s5] sm:$0xf]
  %v6118 = vlaneseq
  %v6119 = vshrl.u32 %v6118, 7
  %v6120 = vsub.s32 0, %v6119
  %v6121 = vrot.slane %v6116, %v6120
  %v6122 = vlaneseq
  %v6123 = vshrl.u32 %v6122, 7
  %v6124 = vsub.s32 1, %v6123
  %v6125 = vrot.slane %v6116, %v6124
  %v6126 = vlaneseq
  %v6127 = vshrl.u32 %v6126, 7
  %v6128 = vsub.s32 2, %v6127
  %v6129 = vrot.slane %v6116, %v6128
  %v6130 = vlaneseq
  %v6131 = vshrl.u32 %v6130, 7
  %v6132 = vsub.s32 3, %v6131
  %v6133 = vrot.slane %v6116, %v6132
  %v6138 = vadd.f32 %v6112, %v6121
  %v6139 = vadd.f32 %v6113, %v6125
  %v6140 = vadd.f32 %v6114, %v6129
  %v6141 = vadd.f32 %v6115, %v6133
  %v6142 = vmax.f32 %v6138, 0.0
  %v6143 = vmax.f32 %v6139, 0.0
  %v6144 = vmax.f32 %v6140, 0.0
  %v6145 = vmax.f32 %v6141, 0.0
  %v6146 = vpack.c.bf16 %v6142, %v6142
  %v6147 = vpack.c.bf16 %v6143, %v6143
  %v6148 = vpack.c.bf16 %v6144, %v6144
  %v6149 = vpack.c.bf16 %v6145, %v6145
  %v6150 = vld [vmem:[%s6] sm:$0xf]
  %v6151 = vld [vmem:[%s6 + $0x4] sm:$0xf]
  %v6152 = vld [vmem:[%s6 + $0x8] sm:$0xf]
  %v6153 = vld [vmem:[%s6 + $0xc] sm:$0xf]
  %v6154 = vld [vmem:[%s6 + $0x10] sm:$0xf]
  %v6155 = vld [vmem:[%s6 + $0x14] sm:$0xf]
  %v6156 = vld [vmem:[%s6 + $0x18] sm:$0xf]
  %v6157 = vld [vmem:[%s6 + $0x1c] sm:$0xf]
  %v6158 = vld [vmem:[%s6 + $0x20] sm:$0xf]
  %v6159 = vld [vmem:[%s6 + $0x24] sm:$0xf]
  %v6160 = vld [vmem:[%s6 + $0x28] sm:$0xf]
  %v6161 = vld [vmem:[%s6 + $0x2c] sm:$0xf]
  %v6162 = vld [vmem:[%s6 + $0x30] sm:$0xf]
  %v6163 = vld [vmem:[%s6 + $0x34] sm:$0xf]
  %v6164 = vld [vmem:[%s6 + $0x38] sm:$0xf]
  %v6165 = vld [vmem:[%s6 + $0x3c] sm:$0xf]
  %v6166 = vld [vmem:[%s6 + $0x40] sm:$0xf]
  %v6167 = vld [vmem:[%s6 + $0x44] sm:$0xf]
  %v6168 = vld [vmem:[%s6 + $0x48] sm:$0xf]
  %v6169 = vld [vmem:[%s6 + $0x4c] sm:$0xf]
  %v6170 = vld [vmem:[%s6 + $0x50] sm:$0xf]
  %v6171 = vld [vmem:[%s6 + $0x54] sm:$0xf]
  %v6172 = vld [vmem:[%s6 + $0x58] sm:$0xf]
  %v6173 = vld [vmem:[%s6 + $0x5c] sm:$0xf]
  %v6174 = vld [vmem:[%s6 + $0x60] sm:$0xf]
  %v6175 = vld [vmem:[%s6 + $0x64] sm:$0xf]
  %v6176 = vld [vmem:[%s6 + $0x68] sm:$0xf]
  %v6177 = vld [vmem:[%s6 + $0x6c] sm:$0xf]
  %v6178 = vld [vmem:[%s6 + $0x70] sm:$0xf]
  %v6179 = vld [vmem:[%s6 + $0x74] sm:$0xf]
  %v6180 = vld [vmem:[%s6 + $0x78] sm:$0xf]
  %v6181 = vld [vmem:[%s6 + $0x7c] sm:$0xf]
  %v6182 = vld [vmem:[%s6 + $0x80] sm:$0xf]
  %v6183 = vld [vmem:[%s6 + $0x84] sm:$0xf]
  %v6184 = vld [vmem:[%s6 + $0x88] sm:$0xf]
  %v6185 = vld [vmem:[%s6 + $0x8c] sm:$0xf]
  %v6186 = vld [vmem:[%s6 + $0x90] sm:$0xf]
  %v6187 = vld [vmem:[%s6 + $0x94] sm:$0xf]
  %v6188 = vld [vmem:[%s6 + $0x98] sm:$0xf]
  %v6189 = vld [vmem:[%s6 + $0x9c] sm:$0xf]
  %v6190 = vld [vmem:[%s6 + $0xa0] sm:$0xf]
  %v6191 = vld [vmem:[%s6 + $0xa4] sm:$0xf]
  %v6192 = vld [vmem:[%s6 + $0xa8] sm:$0xf]
  %v6193 = vld [vmem:[%s6 + $0xac] sm:$0xf]
  %v6194 = vld [vmem:[%s6 + $0xb0] sm:$0xf]
  %v6195 = vld [vmem:[%s6 + $0xb4] sm:$0xf]
  %v6196 = vld [vmem:[%s6 + $0xb8] sm:$0xf]
  %v6197 = vld [vmem:[%s6 + $0xbc] sm:$0xf]
  %v6198 = vld [vmem:[%s6 + $0xc0] sm:$0xf]
  %v6199 = vld [vmem:[%s6 + $0xc4] sm:$0xf]
  %v6200 = vld [vmem:[%s7] sm:$0x1]
  %v6202 = vlaneseq
  %v6203 = vshrl.u32 %v6202, 7
  %v6204 = vsub.s32 0, %v6203
  %v6205 = vrot.slane %v6200, %v6204
  %v6257 = vunpack.c.l.b16 %v6150
  %v6258 = vunpack.c.l.b16 %v6151
  %v6259 = vunpack.c.l.b16 %v6152
  %v6260 = vunpack.c.l.b16 %v6153
  %v6261 = vunpack.c.l.b16 %v6154
  %v6262 = vunpack.c.l.b16 %v6155
  %v6263 = vunpack.c.l.b16 %v6156
  %v6264 = vunpack.c.l.b16 %v6157
  %v6265 = vunpack.c.l.b16 %v6158
  %v6266 = vunpack.c.l.b16 %v6159
  %v6267 = vunpack.c.l.b16 %v6160
  %v6268 = vunpack.c.l.b16 %v6161
  %v6269 = vunpack.c.l.b16 %v6162
  %v6270 = vunpack.c.l.b16 %v6163
  %v6271 = vunpack.c.l.b16 %v6164
  %v6272 = vunpack.c.l.b16 %v6165
  %v6273 = vunpack.c.l.b16 %v6166
  %v6274 = vunpack.c.l.b16 %v6167
  %v6275 = vunpack.c.l.b16 %v6168
  %v6276 = vunpack.c.l.b16 %v6169
  %v6277 = vunpack.c.l.b16 %v6170
  %v6278 = vunpack.c.l.b16 %v6171
  %v6279 = vunpack.c.l.b16 %v6172
  %v6280 = vunpack.c.l.b16 %v6173
  %v6281 = vunpack.c.l.b16 %v6174
  %v6282 = vunpack.c.l.b16 %v6175
  %v6283 = vunpack.c.l.b16 %v6176
  %v6284 = vunpack.c.l.b16 %v6177
  %v6285 = vunpack.c.l.b16 %v6178
  %v6286 = vunpack.c.l.b16 %v6179
  %v6287 = vunpack.c.l.b16 %v6180
  %v6288 = vunpack.c.l.b16 %v6181
  %v6289 = vunpack.c.l.b16 %v6182
  %v6290 = vunpack.c.l.b16 %v6183
  %v6291 = vunpack.c.l.b16 %v6184
  %v6292 = vunpack.c.l.b16 %v6185
  %v6293 = vunpack.c.l.b16 %v6186
  %v6294 = vunpack.c.l.b16 %v6187
  %v6295 = vunpack.c.l.b16 %v6188
  %v6296 = vunpack.c.l.b16 %v6189
  %v6297 = vunpack.c.l.b16 %v6190
  %v6298 = vunpack.c.l.b16 %v6191
  %v6299 = vunpack.c.l.b16 %v6192
  %v6300 = vunpack.c.l.b16 %v6193
  %v6301 = vunpack.c.l.b16 %v6194
  %v6302 = vunpack.c.l.b16 %v6195
  %v6303 = vunpack.c.l.b16 %v6196
  %v6304 = vunpack.c.l.b16 %v6197
  %v6305 = vunpack.c.l.b16 %v6198
  %v6306 = vunpack.c.l.b16 %v6199
  %v6307 = vpack.c.b16 %v6258, %v6257
  %v6308 = vpack.c.b16 %v6260, %v6259
  %v6309 = vpack.c.b16 %v6262, %v6261
  %v6310 = vpack.c.b16 %v6264, %v6263
  %v6311 = vpack.c.b16 %v6266, %v6265
  %v6312 = vpack.c.b16 %v6268, %v6267
  %v6313 = vpack.c.b16 %v6270, %v6269
  %v6314 = vpack.c.b16 %v6272, %v6271
  %v6315 = vpack.c.b16 %v6274, %v6273
  %v6316 = vpack.c.b16 %v6276, %v6275
  %v6317 = vpack.c.b16 %v6278, %v6277
  %v6318 = vpack.c.b16 %v6280, %v6279
  %v6319 = vpack.c.b16 %v6282, %v6281
  %v6320 = vpack.c.b16 %v6284, %v6283
  %v6321 = vpack.c.b16 %v6286, %v6285
  %v6322 = vpack.c.b16 %v6288, %v6287
  %v6323 = vpack.c.b16 %v6290, %v6289
  %v6324 = vpack.c.b16 %v6292, %v6291
  %v6325 = vpack.c.b16 %v6294, %v6293
  %v6326 = vpack.c.b16 %v6296, %v6295
  %v6327 = vpack.c.b16 %v6298, %v6297
  %v6328 = vpack.c.b16 %v6300, %v6299
  %v6329 = vpack.c.b16 %v6302, %v6301
  %v6330 = vpack.c.b16 %v6304, %v6303
  %v6331 = vpack.c.b16 %v6306, %v6305
  %v6358 = vsel %vm1260, %v6149, 0
  %6360 = vmatprep.subr.bf16.mxu0 0
  %6361 = vmatpush1.bf16.msra.mxu0 %v6307
  %6362 = vmatprep.subr.bf16.mxu0 0
  %6363 = vmatpush1.bf16.msra.mxu0 %v6308
  %6364 = vmatprep.subr.bf16.mxu0 0
  %6365 = vmatpush1.bf16.msra.mxu0 %v6309
  %6366 = vmatprep.subr.bf16.mxu0 0
  %6367 = vmatpush1.bf16.msra.mxu0 %v6310
  %6368 = vmatprep.subr.bf16.mxu0 0
  %6369 = vmatpush1.bf16.msra.mxu0 %v6311
  %6370 = vmatprep.subr.bf16.mxu0 0
  %6371 = vmatpush1.bf16.msra.mxu0 %v6312
  %6372 = vmatprep.subr.bf16.mxu0 0
  %6373 = vmatpush1.bf16.msra.mxu0 %v6313
  %6374 = vmatprep.subr.bf16.mxu0 0
  %6375 = vmatpush1.bf16.msra.mxu0 %v6314
  %6376 = vmatprep.subr.bf16.mxu0 0
  %6377 = vmatpush1.bf16.msra.mxu0 %v6315
  %6378 = vmatprep.subr.bf16.mxu0 0
  %6379 = vmatpush1.bf16.msra.mxu0 %v6316
  %6380 = vmatprep.subr.bf16.mxu0 0
  %6381 = vmatpush1.bf16.msra.mxu0 %v6317
  %6382 = vmatprep.subr.bf16.mxu0 0
  %6383 = vmatpush1.bf16.msra.mxu0 %v6318
  %6384 = vmatprep.subr.bf16.mxu0 0
  %6385 = vmatpush1.bf16.msra.mxu0 %v6319
  %6386 = vmatprep.subr.bf16.mxu0 0
  %6387 = vmatpush1.bf16.msra.mxu0 %v6320
  %6388 = vmatprep.subr.bf16.mxu0 0
  %6389 = vmatpush1.bf16.msra.mxu0 %v6321
  %6390 = vmatprep.subr.bf16.mxu0 0
  %6391 = vmatpush1.bf16.msra.mxu0 %v6322
  %6392 = vmatprep.mubr.bf16.mxu0 %v6147
  %6393 = vmatmul.mubr.bf16.gmra.mrb[0].mxu0 %v6146
  %v6394 = vpop.f32.mrb[0].mxu0
  %v6395 = vadd.f32 %v6205, %v6394
  %v6396 = vpop.f32.mrb[0].mxu0
  %v6397 = vpop.f32.mrb[0].mxu0
  %v6398 = vpop.f32.mrb[0].mxu0
  %6399 = vdwg.mxu0
  %6400 = vmatprep.subr.bf16.mxu0 0
  %6401 = vmatpush1.bf16.msra.mxu0 %v6323
  %6402 = vmatprep.subr.bf16.mxu0 0
  %6403 = vmatpush1.bf16.msra.mxu0 %v6324
  %6404 = vmatprep.subr.bf16.mxu0 0
  %6405 = vmatpush1.bf16.msra.mxu0 %v6325
  %6406 = vmatprep.subr.bf16.mxu0 0
  %6407 = vmatpush1.bf16.msra.mxu0 %v6326
  %6408 = vmatprep.subr.bf16.mxu0 0
  %6409 = vmatpush1.bf16.msra.mxu0 %v6327
  %6410 = vmatprep.subr.bf16.mxu0 0
  %6411 = vmatpush1.bf16.msra.mxu0 %v6328
  %6412 = vmatprep.subr.bf16.mxu0 0
  %6413 = vmatpush1.bf16.msra.mxu0 %v6329
  %6414 = vmatprep.subr.bf16.mxu0 0
  %6415 = vmatpush1.bf16.msra.mxu0 %v6330
  %6416 = vmatprep.subr.bf16.mxu0 0
  %6417 = vmatpush1.bf16.msra.mxu0 %v6331
  %6418 = vmatprep.subr.bf16.mxu0 0
  %6419 = vmatpush1.bf16.msra.mxu0 0
  %6420 = vmatprep.subr.bf16.mxu0 0
  %6421 = vmatpush1.bf16.msra.mxu0 0
  %6422 = vmatprep.subr.bf16.mxu0 0
  %6423 = vmatpush1.bf16.msra.mxu0 0
  %6424 = vmatprep.subr.bf16.mxu0 0
  %6425 = vmatpush1.bf16.msra.mxu0 0
  %6426 = vmatprep.subr.bf16.mxu0 0
  %6427 = vmatpush1.bf16.msra.mxu0 0
  %6428 = vmatprep.subr.bf16.mxu0 0
  %6429 = vmatpush1.bf16.msra.mxu0 0
  %6430 = vmatprep.subr.bf16.mxu0 0
  %6431 = vmatpush1.bf16.msra.mxu0 0
  %6432 = vmatprep.mubr.bf16.mxu0 %v6358
  %6433 = vmatmul.mubr.bf16.gmra.mrb[0].mxu0 %v6148
  %v6434 = vpop.f32.mrb[0].mxu0
  %v6435 = vadd.f32 %v6395, %v6434
  %v6436 = vpop.f32.mrb[0].mxu0
  %v6437 = vpop.f32.mrb[0].mxu0
  %v6438 = vpop.f32.mrb[0].mxu0
  %6439 = vdwg.mxu0
  %v6440 = vmax.f32 %v6435, 0.0
  %v6441 = vpack.c.bf16 %v6440, %v6440
  %v6442 = vld [vmem:[%s8] sm:$0xf]
  %v6443 = vld [vmem:[%s8 + $0x4] sm:$0xf]
  %v6444 = vld [vmem:[%s8 + $0x8] sm:$0xf]
  %v6445 = vld [vmem:[%s8 + $0xc] sm:$0xf]
  %v6446 = vld [vmem:[%s8 + $0x10] sm:$0xf]
  %v6447 = vld [vmem:[%s8 + $0x14] sm:$0xf]
  %v6448 = vld [vmem:[%s8 + $0x18] sm:$0xf]
  %v6449 = vld [vmem:[%s8 + $0x1c] sm:$0xf]
  %v6450 = vld [vmem:[%s8 + $0x20] sm:$0xf]
  %v6451 = vld [vmem:[%s8 + $0x24] sm:$0xf]
  %v6452 = vld [vmem:[%s8 + $0x28] sm:$0xf]
  %v6453 = vld [vmem:[%s8 + $0x2c] sm:$0x1]
  %v6454 = vld [vmem:[%s9] sm:$0x1]
  %v6456 = vlaneseq
  %v6457 = vshrl.u32 %v6456, 7
  %v6458 = vsub.s32 0, %v6457
  %v6459 = vrot.slane %v6454, %v6458
  %v6473 = vunpack.c.l.b16 %v6442
  %v6474 = vunpack.c.l.b16 %v6443
  %v6475 = vunpack.c.l.b16 %v6444
  %v6476 = vunpack.c.l.b16 %v6445
  %v6477 = vunpack.c.l.b16 %v6446
  %v6478 = vunpack.c.l.b16 %v6447
  %v6479 = vunpack.c.l.b16 %v6448
  %v6480 = vunpack.c.l.b16 %v6449
  %v6481 = vunpack.c.l.b16 %v6450
  %v6482 = vunpack.c.l.b16 %v6451
  %v6483 = vunpack.c.l.b16 %v6452
  %v6484 = vunpack.c.l.b16 %v6453
  %v6485 = vpack.c.b16 %v6474, %v6473
  %v6486 = vpack.c.b16 %v6476, %v6475
  %v6487 = vpack.c.b16 %v6478, %v6477
  %v6488 = vpack.c.b16 %v6480, %v6479
  %v6489 = vpack.c.b16 %v6482, %v6481
  %v6490 = vpack.c.b16 %v6484, %v6483
  %vm6496 = vcmask 736256
  %v6498 = vsel %vm6496, %v6441, 0
  %vm6500 = vcmask 1044480
  %v6502 = vsel %vm6500, %v6490, 0
  %6504 = vmatprep.subr.bf16.mxu0 0
  %6505 = vmatpush1.bf16.msra.mxu0 %v6485
  %6506 = vmatprep.subr.bf16.mxu0 0
  %6507 = vmatpush1.bf16.msra.mxu0 %v6486
  %6508 = vmatprep.subr.bf16.mxu0 0
  %6509 = vmatpush1.bf16.msra.mxu0 %v6487
  %6510 = vmatprep.subr.bf16.mxu0 0
  %6511 = vmatpush1.bf16.msra.mxu0 %v6488
  %6512 = vmatprep.subr.bf16.mxu0 0
  %6513 = vmatpush1.bf16.msra.mxu0 %v6489
  %6514 = vmatprep.subr.bf16.mxu0 0
  %6515 = vmatpush1.bf16.msra.mxu0 %v6502
  %6516 = vmatprep.subr.bf16.mxu0 0
  %6517 = vmatpush1.bf16.msra.mxu0 0
  %6518 = vmatprep.subr.bf16.mxu0 0
  %6519 = vmatpush1.bf16.msra.mxu0 0
  %6520 = vmatprep.subr.bf16.mxu0 0
  %6521 = vmatpush1.bf16.msra.mxu0 0
  %6522 = vmatprep.subr.bf16.mxu0 0
  %6523 = vmatpush1.bf16.msra.mxu0 0
  %6524 = vmatprep.subr.bf16.mxu0 0
  %6525 = vmatpush1.bf16.msra.mxu0 0
  %6526 = vmatprep.subr.bf16.mxu0 0
  %6527 = vmatpush1.bf16.msra.mxu0 0
  %6528 = vmatprep.subr.bf16.mxu0 0
  %6529 = vmatpush1.bf16.msra.mxu0 0
  %6530 = vmatprep.subr.bf16.mxu0 0
  %6531 = vmatpush1.bf16.msra.mxu0 0
  %6532 = vmatprep.subr.bf16.mxu0 0
  %6533 = vmatpush1.bf16.msra.mxu0 0
  %6534 = vmatprep.subr.bf16.mxu0 0
  %6535 = vmatpush1.bf16.msra.mxu0 0
  %6536 = vmatprep.mubr.bf16.mxu0 0
  %6537 = vmatmul.mubr.bf16.gmra.mrb[0].mxu0 %v6498
  %v6538 = vpop.f32.mrb[0].mxu0
  %v6539 = vadd.f32 %v6459, %v6538
  %v6540 = vpop.f32.mrb[0].mxu0
  %v6541 = vpop.f32.mrb[0].mxu0
  %v6542 = vpop.f32.mrb[0].mxu0
  %6543 = vdwg.mxu0
  %vm6544 = vcmask 80896
  %6545 = vst.msk [vmem:[%s16] sm:$0xff] %vm6544, %v6539
  %v6546 = vpack.c.bf16 %v6539, %v6539
  %v6547 = vld [vmem:[%s10] sm:$0xff]
  %v6548 = vld [vmem:[%s10 + $0x8] sm:$0xff]
  %v6549 = vld [vmem:[%s10 + $0x10] sm:$0x11]
  %v6550 = vld [vmem:[%s10 + $0x18] sm:$0x11]
  %v6551 = vld [vmem:[%s11] sm:$0xf]
  %v6553 = vlaneseq
  %v6554 = vshrl.u32 %v6553, 7
  %v6555 = vsub.s32 0, %v6554
  %v6556 = vrot.slane %v6551, %v6555
  %v6557 = vlaneseq
  %v6558 = vshrl.u32 %v6557, 7
  %v6559 = vsub.s32 1, %v6558
  %v6560 = vrot.slane %v6551, %v6559
  %v6561 = vlaneseq
  %v6562 = vshrl.u32 %v6561, 7
  %v6563 = vsub.s32 2, %v6562
  %v6564 = vrot.slane %v6551, %v6563
  %v6565 = vlaneseq
  %v6566 = vshrl.u32 %v6565, 7
  %v6567 = vsub.s32 3, %v6566
  %v6568 = vrot.slane %v6551, %v6567
  %v6577 = vunpack.c.l.b16 %v6547
  %v6578 = vunpack.c.h.b16 %v6547
  %v6579 = vunpack.c.l.b16 %v6548
  %v6580 = vunpack.c.h.b16 %v6548
  %v6581 = vunpack.c.l.b16 %v6549
  %v6582 = vunpack.c.h.b16 %v6549
  %v6583 = vunpack.c.l.b16 %v6550
  %v6584 = vunpack.c.h.b16 %v6550
  %v6585 = vpack.c.b16 %v6581, %v6577
  %v6586 = vpack.c.b16 %v6582, %v6578
  %v6587 = vpack.c.b16 %v6583, %v6579
  %v6588 = vpack.c.b16 %v6584, %v6580
  %v6590 = vsel %vm6544, %v6546, 0
  %v6593 = vsel %vm6500, %v6585, 0
  %v6596 = vsel %vm6500, %v6586, 0
  %v6599 = vsel %vm6500, %v6587, 0
  %v6602 = vsel %vm6500, %v6588, 0
  %6604 = vmatprep.subr.bf16.mxu0 %v6596
  %6605 = vmatpush1.bf16.msra.mxu0 %v6593
  %6606 = vmatprep.subr.bf16.mxu0 0
  %6607 = vmatpush1.bf16.msra.mxu0 0
  %6608 = vmatprep.subr.bf16.mxu0 0
  %6609 = vmatpush1.bf16.msra.mxu0 0
  %6610 = vmatprep.subr.bf16.mxu0 0
  %6611 = vmatpush1.bf16.msra.mxu0 0
  %6612 = vmatprep.subr.bf16.mxu0 0
  %6613 = vmatpush1.bf16.msra.mxu0 0
  %6614 = vmatprep.subr.bf16.mxu0 0
  %6615 = vmatpush1.bf16.msra.mxu0 0
  %6616 = vmatprep.subr.bf16.mxu0 0
  %6617 = vmatpush1.bf16.msra.mxu0 0
  %6618 = vmatprep.subr.bf16.mxu0 0
  %6619 = vmatpush1.bf16.msra.mxu0 0
  %6620 = vmatprep.subr.bf16.mxu0 0
  %6621 = vmatpush1.bf16.msra.mxu0 0
  %6622 = vmatprep.subr.bf16.mxu0 0
  %6623 = vmatpush1.bf16.msra.mxu0 0
  %6624 = vmatprep.subr.bf16.mxu0 0
  %6625 = vmatpush1.bf16.msra.mxu0 0
  %6626 = vmatprep.subr.bf16.mxu0 0
  %6627 = vmatpush1.bf16.msra.mxu0 0
  %6628 = vmatprep.subr.bf16.mxu0 0
  %6629 = vmatpush1.bf16.msra.mxu0 0
  %6630 = vmatprep.subr.bf16.mxu0 0
  %6631 = vmatpush1.bf16.msra.mxu0 0
  %6632 = vmatprep.subr.bf16.mxu0 0
  %6633 = vmatpush1.bf16.msra.mxu0 0
  %6634 = vmatprep.subr.bf16.mxu0 0
  %6635 = vmatpush1.bf16.msra.mxu0 0
  %6636 = vmatprep.mubr.bf16.mxu0 0
  %6637 = vmatmul.mubr.bf16.gmra.mrb[0].mxu0 %v6590
  %v6638 = vpop.f32.mrb[0].mxu0
  %v6639 = vadd.f32 %v6556, %v6638
  %v6640 = vpop.f32.mrb[0].mxu0
  %v6641 = vadd.f32 %v6560, %v6640
  %v6642 = vpop.f32.mrb[0].mxu0
  %v6643 = vpop.f32.mrb[0].mxu0
  %6644 = vdwg.mxu0
  %6645 = vmatprep.subr.bf16.mxu0 %v6602
  %6646 = vmatpush1.bf16.msra.mxu0 %v6599
  %6647 = vmatprep.subr.bf16.mxu0 0
  %6648 = vmatpush1.bf16.msra.mxu0 0
  %6649 = vmatprep.subr.bf16.mxu0 0
  %6650 = vmatpush1.bf16.msra.mxu0 0
  %6651 = vmatprep.subr.bf16.mxu0 0
  %6652 = vmatpush1.bf16.msra.mxu0 0
  %6653 = vmatprep.subr.bf16.mxu0 0
  %6654 = vmatpush1.bf16.msra.mxu0 0
  %6655 = vmatprep.subr.bf16.mxu0 0
  %6656 = vmatpush1.bf16.msra.mxu0 0
  %6657 = vmatprep.subr.bf16.mxu0 0
  %6658 = vmatpush1.bf16.msra.mxu0 0
  %6659 = vmatprep.subr.bf16.mxu0 0
  %6660 = vmatpush1.bf16.msra.mxu0 0
  %6661 = vmatprep.subr.bf16.mxu0 0
  %6662 = vmatpush1.bf16.msra.mxu0 0
  %6663 = vmatprep.subr.bf16.mxu0 0
  %6664 = vmatpush1.bf16.msra.mxu0 0
  %6665 = vmatprep.subr.bf16.mxu0 0
  %6666 = vmatpush1.bf16.msra.mxu0 0
  %6667 = vmatprep.subr.bf16.mxu0 0
  %6668 = vmatpush1.bf16.msra.mxu0 0
  %6669 = vmatprep.subr.bf16.mxu0 0
  %6670 = vmatpush1.bf16.msra.mxu0 0
  %6671 = vmatprep.subr.bf16.mxu0 0
  %6672 = vmatpush1.bf16.msra.mxu0 0
  %6673 = vmatprep.subr.bf16.mxu0 0
  %6674 = vmatpush1.bf16.msra.mxu0 0
  %6675 = vmatprep.subr.bf16.mxu0 0
  %6676 = vmatpush1.bf16.msra.mxu0 0
  %6677 = vmatprep.mubr.bf16.mxu0 0
  %6678 = vmatmul.mubr.bf16.gmra.mrb[0].mxu0 %v6590
  %v6679 = vpop.f32.mrb[0].mxu0
  %v6680 = vadd.f32 %v6564, %v6679
  %v6681 = vpop.f32.mrb[0].mxu0
  %v6682 = vadd.f32 %v6568, %v6681
  %v6683 = vpop.f32.mrb[0].mxu0
  %v6684 = vpop.f32.mrb[0].mxu0
  %6685 = vdwg.mxu0
  %v6686 = vmax.f32 %v6639, 0.0
  %v6687 = vmax.f32 %v6641, 0.0
  %v6688 = vmax.f32 %v6680, 0.0
  %v6689 = vmax.f32 %v6682, 0.0
  %v6690 = vpack.c.bf16 %v6686, %v6686
  %v6691 = vpack.c.bf16 %v6687, %v6687
  %v6692 = vpack.c.bf16 %v6688, %v6688
  %v6693 = vpack.c.bf16 %v6689, %v6689
  %v6694 = vld [vmem:[%s12] sm:$0xff]
  %v6695 = vld [vmem:[%s12 + $0x8] sm:$0xff]
  %v6696 = vld [vmem:[%s12 + $0x10] sm:$0xff]
  %v6697 = vld [vmem:[%s12 + $0x18] sm:$0xff]
  %v6698 = vld [vmem:[%s12 + $0x20] sm:$0xff]
  %v6699 = vld [vmem:[%s12 + $0x28] sm:$0xff]
  %v6700 = vld [vmem:[%s12 + $0x30] sm:$0xff]
  %v6701 = vld [vmem:[%s12 + $0x38] sm:$0xf]
  %v6702 = vld [vmem:[%s12 + $0x3c] sm:$0xff]
  %v6703 = vld [vmem:[%s12 + $0x44] sm:$0xff]
  %v6704 = vld [vmem:[%s12 + $0x4c] sm:$0xff]
  %v6705 = vld [vmem:[%s12 + $0x54] sm:$0xff]
  %v6706 = vld [vmem:[%s12 + $0x5c] sm:$0xff]
  %v6707 = vld [vmem:[%s12 + $0x64] sm:$0xff]
  %v6708 = vld [vmem:[%s12 + $0x6c] sm:$0xff]
  %v6709 = vld [vmem:[%s12 + $0x74] sm:$0xf]
  %v6710 = vld [vmem:[%s12 + $0x78] sm:$0xff]
  %v6711 = vld [vmem:[%s12 + $0x80] sm:$0xff]
  %v6712 = vld [vmem:[%s12 + $0x88] sm:$0xff]
  %v6713 = vld [vmem:[%s12 + $0x90] sm:$0xff]
  %v6714 = vld [vmem:[%s12 + $0x98] sm:$0xff]
  %v6715 = vld [vmem:[%s12 + $0xa0] sm:$0xff]
  %v6716 = vld [vmem:[%s12 + $0xa8] sm:$0xff]
  %v6717 = vld [vmem:[%s12 + $0xb0] sm:$0xf]
  %v6718 = vld [vmem:[%s12 + $0xb4] sm:$0xff]
  %v6719 = vld [vmem:[%s12 + $0xbc] sm:$0xff]
  %v6720 = vld [vmem:[%s12 + $0xc4] sm:$0xff]
  %v6721 = vld [vmem:[%s12 + $0xcc] sm:$0xff]
  %v6722 = vld [vmem:[%s12 + $0xd4] sm:$0xff]
  %v6723 = vld [vmem:[%s12 + $0xdc] sm:$0xff]
  %v6724 = vld [vmem:[%s12 + $0xe4] sm:$0xff]
  %v6725 = vld [vmem:[%s12 + $0xec] sm:$0xf]
  %v6726 = vld [vmem:[%s12 + $0xf0] sm:$0xff]
  %v6727 = vld [vmem:[%s12 + $0xf8] sm:$0xff]
  %v6728 = vld [vmem:[%s12 + $0x100] sm:$0xff]
  %v6729 = vld [vmem:[%s12 + $0x108] sm:$0xff]
  %v6730 = vld [vmem:[%s12 + $0x110] sm:$0xff]
  %v6731 = vld [vmem:[%s12 + $0x118] sm:$0xff]
  %v6732 = vld [vmem:[%s12 + $0x120] sm:$0xff]
  %v6733 = vld [vmem:[%s12 + $0x128] sm:$0xf]
  %v6734 = vld [vmem:[%s12 + $0x12c] sm:$0xff]
  %v6735 = vld [vmem:[%s12 + $0x134] sm:$0xff]
  %v6736 = vld [vmem:[%s12 + $0x13c] sm:$0xff]
  %v6737 = vld [vmem:[%s12 + $0x144] sm:$0xff]
  %v6738 = vld [vmem:[%s12 + $0x14c] sm:$0xff]
  %v6739 = vld [vmem:[%s12 + $0x154] sm:$0xff]
  %v6740 = vld [vmem:[%s12 + $0x15c] sm:$0xff]
  %v6741 = vld [vmem:[%s12 + $0x164] sm:$0xf]
  %v6742 = vld [vmem:[%s12 + $0x168] sm:$0xff]
  %v6743 = vld [vmem:[%s12 + $0x170] sm:$0xff]
  %v6744 = vld [vmem:[%s12 + $0x178] sm:$0xff]
  %v6745 = vld [vmem:[%s12 + $0x180] sm:$0xff]
  %v6746 = vld [vmem:[%s12 + $0x188] sm:$0xff]
  %v6747 = vld [vmem:[%s12 + $0x190] sm:$0xff]
  %v6748 = vld [vmem:[%s12 + $0x198] sm:$0xff]
  %v6749 = vld [vmem:[%s12 + $0x1a0] sm:$0xf]
  %v6750 = vld [vmem:[%s12 + $0x1a4] sm:$0xff]
  %v6751 = vld [vmem:[%s12 + $0x1ac] sm:$0xff]
  %v6752 = vld [vmem:[%s12 + $0x1b4] sm:$0xff]
  %v6753 = vld [vmem:[%s12 + $0x1bc] sm:$0xff]
  %v6754 = vld [vmem:[%s12 + $0x1c4] sm:$0xff]
  %v6755 = vld [vmem:[%s12 + $0x1cc] sm:$0xff]
  %v6756 = vld [vmem:[%s12 + $0x1d4] sm:$0xff]
  %v6757 = vld [vmem:[%s12 + $0x1dc] sm:$0xf]
  %v6758 = vld [vmem:[%s12 + $0x1e0] sm:$0xff]
  %v6759 = vld [vmem:[%s12 + $0x1e8] sm:$0xff]
  %v6760 = vld [vmem:[%s12 + $0x1f0] sm:$0xff]
  %v6761 = vld [vmem:[%s12 + $0x1f8] sm:$0xff]
  %v6762 = vld [vmem:[%s12 + $0x200] sm:$0xff]
  %v6763 = vld [vmem:[%s12 + $0x208] sm:$0xff]
  %v6764 = vld [vmem:[%s12 + $0x210] sm:$0xff]
  %v6765 = vld [vmem:[%s12 + $0x218] sm:$0xf]
  %v6766 = vld [vmem:[%s12 + $0x21c] sm:$0xff]
  %v6767 = vld [vmem:[%s12 + $0x224] sm:$0xff]
  %v6768 = vld [vmem:[%s12 + $0x22c] sm:$0xff]
  %v6769 = vld [vmem:[%s12 + $0x234] sm:$0xff]
  %v6770 = vld [vmem:[%s12 + $0x23c] sm:$0xff]
  %v6771 = vld [vmem:[%s12 + $0x244] sm:$0xff]
  %v6772 = vld [vmem:[%s12 + $0x24c] sm:$0xff]
  %v6773 = vld [vmem:[%s12 + $0x254] sm:$0xf]
  %v6774 = vld [vmem:[%s12 + $0x258] sm:$0xff]
  %v6775 = vld [vmem:[%s12 + $0x260] sm:$0xff]
  %v6776 = vld [vmem:[%s12 + $0x268] sm:$0xff]
  %v6777 = vld [vmem:[%s12 + $0x270] sm:$0xff]
  %v6778 = vld [vmem:[%s12 + $0x278] sm:$0xff]
  %v6779 = vld [vmem:[%s12 + $0x280] sm:$0xff]
  %v6780 = vld [vmem:[%s12 + $0x288] sm:$0xff]
  %v6781 = vld [vmem:[%s12 + $0x290] sm:$0xf]
  %v6782 = vld [vmem:[%s12 + $0x294] sm:$0xff]
  %v6783 = vld [vmem:[%s12 + $0x29c] sm:$0xff]
  %v6784 = vld [vmem:[%s12 + $0x2a4] sm:$0xff]
  %v6785 = vld [vmem:[%s12 + $0x2ac] sm:$0xff]
  %v6786 = vld [vmem:[%s12 + $0x2b4] sm:$0xff]
  %v6787 = vld [vmem:[%s12 + $0x2bc] sm:$0xff]
  %v6788 = vld [vmem:[%s12 + $0x2c4] sm:$0xff]
  %v6789 = vld [vmem:[%s12 + $0x2cc] sm:$0xf]
  %v6790 = vld [vmem:[%s12 + $0x2d0] sm:$0xff]
  %v6791 = vld [vmem:[%s12 + $0x2d8] sm:$0xff]
  %v6792 = vld [vmem:[%s12 + $0x2e0] sm:$0xff]
  %v6793 = vld [vmem:[%s12 + $0x2e8] sm:$0xff]
  %v6794 = vld [vmem:[%s12 + $0x2f0] sm:$0xff]
  %v6795 = vld [vmem:[%s12 + $0x2f8] sm:$0xff]
  %v6796 = vld [vmem:[%s12 + $0x300] sm:$0xff]
  %v6797 = vld [vmem:[%s12 + $0x308] sm:$0xf]
  %v6798 = vld [vmem:[%s12 + $0x30c] sm:$0xff]
  %v6799 = vld [vmem:[%s12 + $0x314] sm:$0xff]
  %v6800 = vld [vmem:[%s12 + $0x31c] sm:$0xff]
  %v6801 = vld [vmem:[%s12 + $0x324] sm:$0xff]
  %v6802 = vld [vmem:[%s12 + $0x32c] sm:$0xff]
  %v6803 = vld [vmem:[%s12 + $0x334] sm:$0xff]
  %v6804 = vld [vmem:[%s12 + $0x33c] sm:$0xff]
  %v6805 = vld [vmem:[%s12 + $0x344] sm:$0xf]
  %v6806 = vld [vmem:[%s12 + $0x348] sm:$0xff]
  %v6807 = vld [vmem:[%s12 + $0x350] sm:$0xff]
  %v6808 = vld [vmem:[%s12 + $0x358] sm:$0xff]
  %v6809 = vld [vmem:[%s12 + $0x360] sm:$0xff]
  %v6810 = vld [vmem:[%s12 + $0x368] sm:$0xff]
  %v6811 = vld [vmem:[%s12 + $0x370] sm:$0xff]
  %v6812 = vld [vmem:[%s12 + $0x378] sm:$0xff]
  %v6813 = vld [vmem:[%s12 + $0x380] sm:$0xf]
  %v6814 = vld [vmem:[%s12 + $0x384] sm:$0xff]
  %v6815 = vld [vmem:[%s12 + $0x38c] sm:$0xff]
  %v6816 = vld [vmem:[%s12 + $0x394] sm:$0xff]
  %v6817 = vld [vmem:[%s12 + $0x39c] sm:$0xff]
  %v6818 = vld [vmem:[%s12 + $0x3a4] sm:$0xff]
  %v6819 = vld [vmem:[%s12 + $0x3ac] sm:$0xff]
  %v6820 = vld [vmem:[%s12 + $0x3b4] sm:$0xff]
  %v6821 = vld [vmem:[%s12 + $0x3bc] sm:$0xf]
  %v6822 = vld [vmem:[%s12 + $0x3c0] sm:$0xff]
  %v6823 = vld [vmem:[%s12 + $0x3c8] sm:$0xff]
  %v6824 = vld [vmem:[%s12 + $0x3d0] sm:$0xff]
  %v6825 = vld [vmem:[%s12 + $0x3d8] sm:$0xff]
  %v6826 = vld [vmem:[%s12 + $0x3e0] sm:$0xff]
  %v6827 = vld [vmem:[%s12 + $0x3e8] sm:$0xff]
  %v6828 = vld [vmem:[%s12 + $0x3f0] sm:$0xff]
  %v6829 = vld [vmem:[%s12 + $0x3f8] sm:$0xf]
  %v6830 = vld [vmem:[%s12 + $0x3fc] sm:$0xff]
  %v6831 = vld [vmem:[%s12 + $0x404] sm:$0xff]
  %v6832 = vld [vmem:[%s12 + $0x40c] sm:$0xff]
  %v6833 = vld [vmem:[%s12 + $0x414] sm:$0xff]
  %v6834 = vld [vmem:[%s12 + $0x41c] sm:$0xff]
  %v6835 = vld [vmem:[%s12 + $0x424] sm:$0xff]
  %v6836 = vld [vmem:[%s12 + $0x42c] sm:$0xff]
  %v6837 = vld [vmem:[%s12 + $0x434] sm:$0xf]
  %v6838 = vld [vmem:[%s12 + $0x438] sm:$0xff]
  %v6839 = vld [vmem:[%s12 + $0x440] sm:$0xff]
  %v6840 = vld [vmem:[%s12 + $0x448] sm:$0xff]
  %v6841 = vld [vmem:[%s12 + $0x450] sm:$0xff]
  %v6842 = vld [vmem:[%s12 + $0x458] sm:$0xff]
  %v6843 = vld [vmem:[%s12 + $0x460] sm:$0xff]
  %v6844 = vld [vmem:[%s12 + $0x468] sm:$0xff]
  %v6845 = vld [vmem:[%s12 + $0x470] sm:$0xf]
  %v6846 = vld [vmem:[%s12 + $0x474] sm:$0xff]
  %v6847 = vld [vmem:[%s12 + $0x47c] sm:$0xff]
  %v6848 = vld [vmem:[%s12 + $0x484] sm:$0xff]
  %v6849 = vld [vmem:[%s12 + $0x48c] sm:$0xff]
  %v6850 = vld [vmem:[%s12 + $0x494] sm:$0xff]
  %v6851 = vld [vmem:[%s12 + $0x49c] sm:$0xff]
  %v6852 = vld [vmem:[%s12 + $0x4a4] sm:$0xff]
  %v6853 = vld [vmem:[%s12 + $0x4ac] sm:$0xf]
  %v6854 = vld [vmem:[%s12 + $0x4b0] sm:$0xff]
  %v6855 = vld [vmem:[%s12 + $0x4b8] sm:$0xff]
  %v6856 = vld [vmem:[%s12 + $0x4c0] sm:$0xff]
  %v6857 = vld [vmem:[%s12 + $0x4c8] sm:$0xff]
  %v6858 = vld [vmem:[%s12 + $0x4d0] sm:$0xff]
  %v6859 = vld [vmem:[%s12 + $0x4d8] sm:$0xff]
  %v6860 = vld [vmem:[%s12 + $0x4e0] sm:$0xff]
  %v6861 = vld [vmem:[%s12 + $0x4e8] sm:$0xf]
  %v6862 = vld [vmem:[%s12 + $0x4ec] sm:$0xff]
  %v6863 = vld [vmem:[%s12 + $0x4f4] sm:$0xff]
  %v6864 = vld [vmem:[%s12 + $0x4fc] sm:$0xff]
  %v6865 = vld [vmem:[%s12 + $0x504] sm:$0xff]
  %v6866 = vld [vmem:[%s12 + $0x50c] sm:$0xff]
  %v6867 = vld [vmem:[%s12 + $0x514] sm:$0xff]
  %v6868 = vld [vmem:[%s12 + $0x51c] sm:$0xff]
  %v6869 = vld [vmem:[%s12 + $0x524] sm:$0xf]
  %v6870 = vld [vmem:[%s12 + $0x528] sm:$0xff]
  %v6871 = vld [vmem:[%s12 + $0x530] sm:$0xff]
  %v6872 = vld [vmem:[%s12 + $0x538] sm:$0xff]
  %v6873 = vld [vmem:[%s12 + $0x540] sm:$0xff]
  %v6874 = vld [vmem:[%s12 + $0x548] sm:$0xff]
  %v6875 = vld [vmem:[%s12 + $0x550] sm:$0xff]
  %v6876 = vld [vmem:[%s12 + $0x558] sm:$0xff]
  %v6877 = vld [vmem:[%s12 + $0x560] sm:$0xf]
  %v6878 = vld [vmem:[%s12 + $0x564] sm:$0xff]
  %v6879 = vld [vmem:[%s12 + $0x56c] sm:$0xff]
  %v6880 = vld [vmem:[%s12 + $0x574] sm:$0xff]
  %v6881 = vld [vmem:[%s12 + $0x57c] sm:$0xff]
  %v6882 = vld [vmem:[%s12 + $0x584] sm:$0xff]
  %v6883 = vld [vmem:[%s12 + $0x58c] sm:$0xff]
  %v6884 = vld [vmem:[%s12 + $0x594] sm:$0xff]
  %v6885 = vld [vmem:[%s12 + $0x59c] sm:$0xf]
  %v6886 = vld [vmem:[%s12 + $0x5a0] sm:$0xff]
  %v6887 = vld [vmem:[%s12 + $0x5a8] sm:$0xff]
  %v6888 = vld [vmem:[%s12 + $0x5b0] sm:$0xff]
  %v6889 = vld [vmem:[%s12 + $0x5b8] sm:$0xff]
  %v6890 = vld [vmem:[%s12 + $0x5c0] sm:$0xff]
  %v6891 = vld [vmem:[%s12 + $0x5c8] sm:$0xff]
  %v6892 = vld [vmem:[%s12 + $0x5d0] sm:$0xff]
  %v6893 = vld [vmem:[%s12 + $0x5d8] sm:$0xf]
  %v6894 = vld [vmem:[%s12 + $0x5dc] sm:$0xff]
  %v6895 = vld [vmem:[%s12 + $0x5e4] sm:$0xff]
  %v6896 = vld [vmem:[%s12 + $0x5ec] sm:$0xff]
  %v6897 = vld [vmem:[%s12 + $0x5f4] sm:$0xff]
  %v6898 = vld [vmem:[%s12 + $0x5fc] sm:$0xff]
  %v6899 = vld [vmem:[%s12 + $0x604] sm:$0xff]
  %v6900 = vld [vmem:[%s12 + $0x60c] sm:$0xff]
  %v6901 = vld [vmem:[%s12 + $0x614] sm:$0xf]
  %v6902 = vld [vmem:[%s12 + $0x618] sm:$0xff]
  %v6903 = vld [vmem:[%s12 + $0x620] sm:$0xff]
  %v6904 = vld [vmem:[%s12 + $0x628] sm:$0xff]
  %v6905 = vld [vmem:[%s12 + $0x630] sm:$0xff]
  %v6906 = vld [vmem:[%s12 + $0x638] sm:$0xff]
  %v6907 = vld [vmem:[%s12 + $0x640] sm:$0xff]
  %v6908 = vld [vmem:[%s12 + $0x648] sm:$0xff]
  %v6909 = vld [vmem:[%s12 + $0x650] sm:$0xf]
  %v6910 = vld [vmem:[%s12 + $0x654] sm:$0xff]
  %v6911 = vld [vmem:[%s12 + $0x65c] sm:$0xff]
  %v6912 = vld [vmem:[%s12 + $0x664] sm:$0xff]
  %v6913 = vld [vmem:[%s12 + $0x66c] sm:$0xff]
  %v6914 = vld [vmem:[%s12 + $0x674] sm:$0xff]
  %v6915 = vld [vmem:[%s12 + $0x67c] sm:$0xff]
  %v6916 = vld [vmem:[%s12 + $0x684] sm:$0xff]
  %v6917 = vld [vmem:[%s12 + $0x68c] sm:$0xf]
  %v6918 = vld [vmem:[%s12 + $0x690] sm:$0xff]
  %v6919 = vld [vmem:[%s12 + $0x698] sm:$0xff]
  %v6920 = vld [vmem:[%s12 + $0x6a0] sm:$0xff]
  %v6921 = vld [vmem:[%s12 + $0x6a8] sm:$0xff]
  %v6922 = vld [vmem:[%s12 + $0x6b0] sm:$0xff]
  %v6923 = vld [vmem:[%s12 + $0x6b8] sm:$0xff]
  %v6924 = vld [vmem:[%s12 + $0x6c0] sm:$0xff]
  %v6925 = vld [vmem:[%s12 + $0x6c8] sm:$0xf]
  %v6926 = vld [vmem:[%s12 + $0x6cc] sm:$0xff]
  %v6927 = vld [vmem:[%s12 + $0x6d4] sm:$0xff]
  %v6928 = vld [vmem:[%s12 + $0x6dc] sm:$0xff]
  %v6929 = vld [vmem:[%s12 + $0x6e4] sm:$0xff]
  %v6930 = vld [vmem:[%s12 + $0x6ec] sm:$0xff]
  %v6931 = vld [vmem:[%s12 + $0x6f4] sm:$0xff]
  %v6932 = vld [vmem:[%s12 + $0x6fc] sm:$0xff]
  %v6933 = vld [vmem:[%s12 + $0x704] sm:$0xf]
  %v6934 = vld [vmem:[%s12 + $0x708] sm:$0xff]
  %v6935 = vld [vmem:[%s12 + $0x710] sm:$0xff]
  %v6936 = vld [vmem:[%s12 + $0x718] sm:$0xff]
  %v6937 = vld [vmem:[%s12 + $0x720] sm:$0xff]
  %v6938 = vld [vmem:[%s12 + $0x728] sm:$0xff]
  %v6939 = vld [vmem:[%s12 + $0x730] sm:$0xff]
  %v6940 = vld [vmem:[%s12 + $0x738] sm:$0xff]
  %v6941 = vld [vmem:[%s12 + $0x740] sm:$0xf]
  %v6942 = vld [vmem:[%s12 + $0x744] sm:$0xff]
  %v6943 = vld [vmem:[%s12 + $0x74c] sm:$0xff]
  %v6944 = vld [vmem:[%s12 + $0x754] sm:$0xff]
  %v6945 = vld [vmem:[%s12 + $0x75c] sm:$0xff]
  %v6946 = vld [vmem:[%s12 + $0x764] sm:$0xff]
  %v6947 = vld [vmem:[%s12 + $0x76c] sm:$0xff]
  %v6948 = vld [vmem:[%s12 + $0x774] sm:$0xff]
  %v6949 = vld [vmem:[%s12 + $0x77c] sm:$0xf]
  %v6950 = vld [vmem:[%s12 + $0x780] sm:$0xff]
  %v6951 = vld [vmem:[%s12 + $0x788] sm:$0xff]
  %v6952 = vld [vmem:[%s12 + $0x790] sm:$0xff]
  %v6953 = vld [vmem:[%s12 + $0x798] sm:$0xff]
  %v6954 = vld [vmem:[%s12 + $0x7a0] sm:$0xff]
  %v6955 = vld [vmem:[%s12 + $0x7a8] sm:$0xff]
  %v6956 = vld [vmem:[%s12 + $0x7b0] sm:$0xff]
  %v6957 = vld [vmem:[%s12 + $0x7b8] sm:$0xf]
  %v6958 = vld [vmem:[%s12 + $0x7bc] sm:$0xff]
  %v6959 = vld [vmem:[%s12 + $0x7c4] sm:$0xff]
  %v6960 = vld [vmem:[%s12 + $0x7cc] sm:$0xff]
  %v6961 = vld [vmem:[%s12 + $0x7d4] sm:$0xff]
  %v6962 = vld [vmem:[%s12 + $0x7dc] sm:$0xff]
  %v6963 = vld [vmem:[%s12 + $0x7e4] sm:$0xff]
  %v6964 = vld [vmem:[%s12 + $0x7ec] sm:$0xff]
  %v6965 = vld [vmem:[%s12 + $0x7f4] sm:$0xf]
  %v6966 = vld [vmem:[%s12 + $0x7f8] sm:$0xff]
  %v6967 = vld [vmem:[%s12 + $0x800] sm:$0xff]
  %v6968 = vld [vmem:[%s12 + $0x808] sm:$0xff]
  %v6969 = vld [vmem:[%s12 + $0x810] sm:$0xff]
  %v6970 = vld [vmem:[%s12 + $0x818] sm:$0xff]
  %v6971 = vld [vmem:[%s12 + $0x820] sm:$0xff]
  %v6972 = vld [vmem:[%s12 + $0x828] sm:$0xff]
  %v6973 = vld [vmem:[%s12 + $0x830] sm:$0xf]
  %v6974 = vld [vmem:[%s12 + $0x834] sm:$0xff]
  %v6975 = vld [vmem:[%s12 + $0x83c] sm:$0xff]
  %v6976 = vld [vmem:[%s12 + $0x844] sm:$0xff]
  %v6977 = vld [vmem:[%s12 + $0x84c] sm:$0xff]
  %v6978 = vld [vmem:[%s12 + $0x854] sm:$0xff]
  %v6979 = vld [vmem:[%s12 + $0x85c] sm:$0xff]
  %v6980 = vld [vmem:[%s12 + $0x864] sm:$0xff]
  %v6981 = vld [vmem:[%s12 + $0x86c] sm:$0xf]
  %v6982 = vld [vmem:[%s12 + $0x870] sm:$0xff]
  %v6983 = vld [vmem:[%s12 + $0x878] sm:$0xff]
  %v6984 = vld [vmem:[%s12 + $0x880] sm:$0xff]
  %v6985 = vld [vmem:[%s12 + $0x888] sm:$0xff]
  %v6986 = vld [vmem:[%s12 + $0x890] sm:$0xff]
  %v6987 = vld [vmem:[%s12 + $0x898] sm:$0xff]
  %v6988 = vld [vmem:[%s12 + $0x8a0] sm:$0xff]
  %v6989 = vld [vmem:[%s12 + $0x8a8] sm:$0xf]
  %v6990 = vld [vmem:[%s12 + $0x8ac] sm:$0xff]
  %v6991 = vld [vmem:[%s12 + $0x8b4] sm:$0xff]
  %v6992 = vld [vmem:[%s12 + $0x8bc] sm:$0xff]
  %v6993 = vld [vmem:[%s12 + $0x8c4] sm:$0xff]
  %v6994 = vld [vmem:[%s12 + $0x8cc] sm:$0xff]
  %v6995 = vld [vmem:[%s12 + $0x8d4] sm:$0xff]
  %v6996 = vld [vmem:[%s12 + $0x8dc] sm:$0xff]
  %v6997 = vld [vmem:[%s12 + $0x8e4] sm:$0xf]
  %v6998 = vld [vmem:[%s12 + $0x8e8] sm:$0xff]
  %v6999 = vld [vmem:[%s12 + $0x8f0] sm:$0xff]
  %v7000 = vld [vmem:[%s12 + $0x8f8] sm:$0xff]
  %v7001 = vld [vmem:[%s12 + $0x900] sm:$0xff]
  %v7002 = vld [vmem:[%s12 + $0x908] sm:$0xff]
  %v7003 = vld [vmem:[%s12 + $0x910] sm:$0xff]
  %v7004 = vld [vmem:[%s12 + $0x918] sm:$0xff]
  %v7005 = vld [vmem:[%s12 + $0x920] sm:$0xf]
  %v7006 = vld [vmem:[%s12 + $0x924] sm:$0xff]
  %v7007 = vld [vmem:[%s12 + $0x92c] sm:$0xff]
  %v7008 = vld [vmem:[%s12 + $0x934] sm:$0xff]
  %v7009 = vld [vmem:[%s12 + $0x93c] sm:$0xff]
  %v7010 = vld [vmem:[%s12 + $0x944] sm:$0xff]
  %v7011 = vld [vmem:[%s12 + $0x94c] sm:$0xff]
  %v7012 = vld [vmem:[%s12 + $0x954] sm:$0xff]
  %v7013 = vld [vmem:[%s12 + $0x95c] sm:$0xf]
  %v7014 = vld [vmem:[%s12 + $0x960] sm:$0xff]
  %v7015 = vld [vmem:[%s12 + $0x968] sm:$0xff]
  %v7016 = vld [vmem:[%s12 + $0x970] sm:$0xff]
  %v7017 = vld [vmem:[%s12 + $0x978] sm:$0xff]
  %v7018 = vld [vmem:[%s12 + $0x980] sm:$0xff]
  %v7019 = vld [vmem:[%s12 + $0x988] sm:$0xff]
  %v7020 = vld [vmem:[%s12 + $0x990] sm:$0xff]
  %v7021 = vld [vmem:[%s12 + $0x998] sm:$0xf]
  %v7022 = vld [vmem:[%s12 + $0x99c] sm:$0xff]
  %v7023 = vld [vmem:[%s12 + $0x9a4] sm:$0xff]
  %v7024 = vld [vmem:[%s12 + $0x9ac] sm:$0xff]
  %v7025 = vld [vmem:[%s12 + $0x9b4] sm:$0xff]
  %v7026 = vld [vmem:[%s12 + $0x9bc] sm:$0xff]
  %v7027 = vld [vmem:[%s12 + $0x9c4] sm:$0xff]
  %v7028 = vld [vmem:[%s12 + $0x9cc] sm:$0xff]
  %v7029 = vld [vmem:[%s12 + $0x9d4] sm:$0xf]
  %v7030 = vld [vmem:[%s12 + $0x9d8] sm:$0xff]
  %v7031 = vld [vmem:[%s12 + $0x9e0] sm:$0xff]
  %v7032 = vld [vmem:[%s12 + $0x9e8] sm:$0xff]
  %v7033 = vld [vmem:[%s12 + $0x9f0] sm:$0xff]
  %v7034 = vld [vmem:[%s12 + $0x9f8] sm:$0xff]
  %v7035 = vld [vmem:[%s12 + $0xa00] sm:$0xff]
  %v7036 = vld [vmem:[%s12 + $0xa08] sm:$0xff]
  %v7037 = vld [vmem:[%s12 + $0xa10] sm:$0xf]
  %v7038 = vld [vmem:[%s12 + $0xa14] sm:$0xff]
  %v7039 = vld [vmem:[%s12 + $0xa1c] sm:$0xff]
  %v7040 = vld [vmem:[%s12 + $0xa24] sm:$0xff]
  %v7041 = vld [vmem:[%s12 + $0xa2c] sm:$0xff]
  %v7042 = vld [vmem:[%s12 + $0xa34] sm:$0xff]
  %v7043 = vld [vmem:[%s12 + $0xa3c] sm:$0xff]
  %v7044 = vld [vmem:[%s12 + $0xa44] sm:$0xff]
  %v7045 = vld [vmem:[%s12 + $0xa4c] sm:$0xf]
  %v7046 = vld [vmem:[%s12 + $0xa50] sm:$0xff]
  %v7047 = vld [vmem:[%s12 + $0xa58] sm:$0xff]
  %v7048 = vld [vmem:[%s12 + $0xa60] sm:$0xff]
  %v7049 = vld [vmem:[%s12 + $0xa68] sm:$0xff]
  %v7050 = vld [vmem:[%s12 + $0xa70] sm:$0xff]
  %v7051 = vld [vmem:[%s12 + $0xa78] sm:$0xff]
  %v7052 = vld [vmem:[%s12 + $0xa80] sm:$0xff]
  %v7053 = vld [vmem:[%s12 + $0xa88] sm:$0xf]
  %v7054 = vld [vmem:[%s12 + $0xa8c] sm:$0xff]
  %v7055 = vld [vmem:[%s12 + $0xa94] sm:$0xff]
  %v7056 = vld [vmem:[%s12 + $0xa9c] sm:$0xff]
  %v7057 = vld [vmem:[%s12 + $0xaa4] sm:$0xff]
  %v7058 = vld [vmem:[%s12 + $0xaac] sm:$0xff]
  %v7059 = vld [vmem:[%s12 + $0xab4] sm:$0xff]
  %v7060 = vld [vmem:[%s12 + $0xabc] sm:$0xff]
  %v7061 = vld [vmem:[%s12 + $0xac4] sm:$0xf]
  %v7062 = vld [vmem:[%s12 + $0xac8] sm:$0xff]
  %v7063 = vld [vmem:[%s12 + $0xad0] sm:$0xff]
  %v7064 = vld [vmem:[%s12 + $0xad8] sm:$0xff]
  %v7065 = vld [vmem:[%s12 + $0xae0] sm:$0xff]
  %v7066 = vld [vmem:[%s12 + $0xae8] sm:$0xff]
  %v7067 = vld [vmem:[%s12 + $0xaf0] sm:$0xff]
  %v7068 = vld [vmem:[%s12 + $0xaf8] sm:$0xff]
  %v7069 = vld [vmem:[%s12 + $0xb00] sm:$0xf]
  %v7070 = vld [vmem:[%s12 + $0xb04] sm:$0xff]
  %v7071 = vld [vmem:[%s12 + $0xb0c] sm:$0xff]
  %v7072 = vld [vmem:[%s12 + $0xb14] sm:$0xff]
  %v7073 = vld [vmem:[%s12 + $0xb1c] sm:$0xff]
  %v7074 = vld [vmem:[%s12 + $0xb24] sm:$0xff]
  %v7075 = vld [vmem:[%s12 + $0xb2c] sm:$0xff]
  %v7076 = vld [vmem:[%s12 + $0xb34] sm:$0xff]
  %v7077 = vld [vmem:[%s12 + $0xb3c] sm:$0xf]
  %v7078 = vld [vmem:[%s12 + $0xb40] sm:$0xff]
  %v7079 = vld [vmem:[%s12 + $0xb48] sm:$0xff]
  %v7080 = vld [vmem:[%s12 + $0xb50] sm:$0xff]
  %v7081 = vld [vmem:[%s12 + $0xb58] sm:$0xff]
  %v7082 = vld [vmem:[%s12 + $0xb60] sm:$0xff]
  %v7083 = vld [vmem:[%s12 + $0xb68] sm:$0xff]
  %v7084 = vld [vmem:[%s12 + $0xb70] sm:$0xff]
  %v7085 = vld [vmem:[%s12 + $0xb78] sm:$0xf]
  %v7086 = vld [vmem:[%s12 + $0xb7c] sm:$0xff]
  %v7087 = vld [vmem:[%s12 + $0xb84] sm:$0xff]
  %v7088 = vld [vmem:[%s12 + $0xb8c] sm:$0xff]
  %v7089 = vld [vmem:[%s12 + $0xb94] sm:$0xff]
  %v7090 = vld [vmem:[%s12 + $0xb9c] sm:$0xff]
  %v7091 = vld [vmem:[%s12 + $0xba4] sm:$0xff]
  %v7092 = vld [vmem:[%s12 + $0xbac] sm:$0xff]
  %v7093 = vld [vmem:[%s12 + $0xbb4] sm:$0xf]
  %v7094 = vld [vmem:[%s13] sm:$0xff]
  %v7095 = vld [vmem:[%s13 + $0x8] sm:$0x7f]
  %v7098 = vlaneseq
  %v7099 = vshrl.u32 %v7098, 7
  %v7100 = vsub.s32 0, %v7099
  %v7101 = vrot.slane %v7094, %v7100
  %v7102 = vlaneseq
  %v7103 = vshrl.u32 %v7102, 7
  %v7104 = vsub.s32 1, %v7103
  %v7105 = vrot.slane %v7094, %v7104
  %v7106 = vlaneseq
  %v7107 = vshrl.u32 %v7106, 7
  %v7108 = vsub.s32 2, %v7107
  %v7109 = vrot.slane %v7094, %v7108
  %v7110 = vlaneseq
  %v7111 = vshrl.u32 %v7110, 7
  %v7112 = vsub.s32 3, %v7111
  %v7113 = vrot.slane %v7094, %v7112
  %v7114 = vlaneseq
  %v7115 = vshrl.u32 %v7114, 7
  %v7116 = vsub.s32 4, %v7115
  %v7117 = vrot.slane %v7094, %v7116
  %v7118 = vlaneseq
  %v7119 = vshrl.u32 %v7118, 7
  %v7120 = vsub.s32 5, %v7119
  %v7121 = vrot.slane %v7094, %v7120
  %v7122 = vlaneseq
  %v7123 = vshrl.u32 %v7122, 7
  %v7124 = vsub.s32 6, %v7123
  %v7125 = vrot.slane %v7094, %v7124
  %v7126 = vlaneseq
  %v7127 = vshrl.u32 %v7126, 7
  %v7128 = vsub.s32 7, %v7127
  %v7129 = vrot.slane %v7094, %v7128
  %v7130 = vlaneseq
  %v7131 = vshrl.u32 %v7130, 7
  %v7132 = vsub.s32 0, %v7131
  %v7133 = vrot.slane %v7095, %v7132
  %v7134 = vlaneseq
  %v7135 = vshrl.u32 %v7134, 7
  %v7136 = vsub.s32 1, %v7135
  %v7137 = vrot.slane %v7095, %v7136
  %v7138 = vlaneseq
  %v7139 = vshrl.u32 %v7138, 7
  %v7140 = vsub.s32 2, %v7139
  %v7141 = vrot.slane %v7095, %v7140
  %v7142 = vlaneseq
  %v7143 = vshrl.u32 %v7142, 7
  %v7144 = vsub.s32 3, %v7143
  %v7145 = vrot.slane %v7095, %v7144
  %v7146 = vlaneseq
  %v7147 = vshrl.u32 %v7146, 7
  %v7148 = vsub.s32 4, %v7147
  %v7149 = vrot.slane %v7095, %v7148
  %v7150 = vlaneseq
  %v7151 = vshrl.u32 %v7150, 7
  %v7152 = vsub.s32 5, %v7151
  %v7153 = vrot.slane %v7095, %v7152
  %v7154 = vlaneseq
  %v7155 = vshrl.u32 %v7154, 7
  %v7156 = vsub.s32 6, %v7155
  %v7157 = vrot.slane %v7095, %v7156
  %v7573 = vunpack.c.l.b16 %v6694
  %v7574 = vunpack.c.h.b16 %v6694
  %v7575 = vunpack.c.l.b16 %v6695
  %v7576 = vunpack.c.h.b16 %v6695
  %v7577 = vunpack.c.l.b16 %v6696
  %v7578 = vunpack.c.h.b16 %v6696
  %v7579 = vunpack.c.l.b16 %v6697
  %v7580 = vunpack.c.h.b16 %v6697
  %v7581 = vunpack.c.l.b16 %v6698
  %v7582 = vunpack.c.h.b16 %v6698
  %v7583 = vunpack.c.l.b16 %v6699
  %v7584 = vunpack.c.h.b16 %v6699
  %v7585 = vunpack.c.l.b16 %v6700
  %v7586 = vunpack.c.h.b16 %v6700
  %v7587 = vunpack.c.l.b16 %v6701
  %v7588 = vunpack.c.l.b16 %v6702
  %v7589 = vunpack.c.h.b16 %v6702
  %v7590 = vunpack.c.l.b16 %v6703
  %v7591 = vunpack.c.h.b16 %v6703
  %v7592 = vunpack.c.l.b16 %v6704
  %v7593 = vunpack.c.h.b16 %v6704
  %v7594 = vunpack.c.l.b16 %v6705
  %v7595 = vunpack.c.h.b16 %v6705
  %v7596 = vunpack.c.l.b16 %v6706
  %v7597 = vunpack.c.h.b16 %v6706
  %v7598 = vunpack.c.l.b16 %v6707
  %v7599 = vunpack.c.h.b16 %v6707
  %v7600 = vunpack.c.l.b16 %v6708
  %v7601 = vunpack.c.h.b16 %v6708
  %v7602 = vunpack.c.l.b16 %v6709
  %v7603 = vunpack.c.l.b16 %v6710
  %v7604 = vunpack.c.h.b16 %v6710
  %v7605 = vunpack.c.l.b16 %v6711
  %v7606 = vunpack.c.h.b16 %v6711
  %v7607 = vunpack.c.l.b16 %v6712
  %v7608 = vunpack.c.h.b16 %v6712
  %v7609 = vunpack.c.l.b16 %v6713
  %v7610 = vunpack.c.h.b16 %v6713
  %v7611 = vunpack.c.l.b16 %v6714
  %v7612 = vunpack.c.h.b16 %v6714
  %v7613 = vunpack.c.l.b16 %v6715
  %v7614 = vunpack.c.h.b16 %v6715
  %v7615 = vunpack.c.l.b16 %v6716
  %v7616 = vunpack.c.h.b16 %v6716
  %v7617 = vunpack.c.l.b16 %v6717
  %v7618 = vunpack.c.l.b16 %v6718
  %v7619 = vunpack.c.h.b16 %v6718
  %v7620 = vunpack.c.l.b16 %v6719
  %v7621 = vunpack.c.h.b16 %v6719
  %v7622 = vunpack.c.l.b16 %v6720
  %v7623 = vunpack.c.h.b16 %v6720
  %v7624 = vunpack.c.l.b16 %v6721
  %v7625 = vunpack.c.h.b16 %v6721
  %v7626 = vunpack.c.l.b16 %v6722
  %v7627 = vunpack.c.h.b16 %v6722
  %v7628 = vunpack.c.l.b16 %v6723
  %v7629 = vunpack.c.h.b16 %v6723
  %v7630 = vunpack.c.l.b16 %v6724
  %v7631 = vunpack.c.h.b16 %v6724
  %v7632 = vunpack.c.l.b16 %v6725
  %v7633 = vunpack.c.l.b16 %v6726
  %v7634 = vunpack.c.h.b16 %v6726
  %v7635 = vunpack.c.l.b16 %v6727
  %v7636 = vunpack.c.h.b16 %v6727
  %v7637 = vunpack.c.l.b16 %v6728
  %v7638 = vunpack.c.h.b16 %v6728
  %v7639 = vunpack.c.l.b16 %v6729
  %v7640 = vunpack.c.h.b16 %v6729
  %v7641 = vunpack.c.l.b16 %v6730
  %v7642 = vunpack.c.h.b16 %v6730
  %v7643 = vunpack.c.l.b16 %v6731
  %v7644 = vunpack.c.h.b16 %v6731
  %v7645 = vunpack.c.l.b16 %v6732
  %v7646 = vunpack.c.h.b16 %v6732
  %v7647 = vunpack.c.l.b16 %v6733
  %v7648 = vunpack.c.l.b16 %v6734
  %v7649 = vunpack.c.h.b16 %v6734
  %v7650 = vunpack.c.l.b16 %v6735
  %v7651 = vunpack.c.h.b16 %v6735
  %v7652 = vunpack.c.l.b16 %v6736
  %v7653 = vunpack.c.h.b16 %v6736
  %v7654 = vunpack.c.l.b16 %v6737
  %v7655 = vunpack.c.h.b16 %v6737
  %v7656 = vunpack.c.l.b16 %v6738
  %v7657 = vunpack.c.h.b16 %v6738
  %v7658 = vunpack.c.l.b16 %v6739
  %v7659 = vunpack.c.h.b16 %v6739
  %v7660 = vunpack.c.l.b16 %v6740
  %v7661 = vunpack.c.h.b16 %v6740
  %v7662 = vunpack.c.l.b16 %v6741
  %v7663 = vunpack.c.l.b16 %v6742
  %v7664 = vunpack.c.h.b16 %v6742
  %v7665 = vunpack.c.l.b16 %v6743
  %v7666 = vunpack.c.h.b16 %v6743
  %v7667 = vunpack.c.l.b16 %v6744
  %v7668 = vunpack.c.h.b16 %v6744
  %v7669 = vunpack.c.l.b16 %v6745
  %v7670 = vunpack.c.h.b16 %v6745
  %v7671 = vunpack.c.l.b16 %v6746
  %v7672 = vunpack.c.h.b16 %v6746
  %v7673 = vunpack.c.l.b16 %v6747
  %v7674 = vunpack.c.h.b16 %v6747
  %v7675 = vunpack.c.l.b16 %v6748
  %v7676 = vunpack.c.h.b16 %v6748
  %v7677 = vunpack.c.l.b16 %v6749
  %v7678 = vunpack.c.l.b16 %v6750
  %v7679 = vunpack.c.h.b16 %v6750
  %v7680 = vunpack.c.l.b16 %v6751
  %v7681 = vunpack.c.h.b16 %v6751
  %v7682 = vunpack.c.l.b16 %v6752
  %v7683 = vunpack.c.h.b16 %v6752
  %v7684 = vunpack.c.l.b16 %v6753
  %v7685 = vunpack.c.h.b16 %v6753
  %v7686 = vunpack.c.l.b16 %v6754
  %v7687 = vunpack.c.h.b16 %v6754
  %v7688 = vunpack.c.l.b16 %v6755
  %v7689 = vunpack.c.h.b16 %v6755
  %v7690 = vunpack.c.l.b16 %v6756
  %v7691 = vunpack.c.h.b16 %v6756
  %v7692 = vunpack.c.l.b16 %v6757
  %v7693 = vunpack.c.l.b16 %v6758
  %v7694 = vunpack.c.h.b16 %v6758
  %v7695 = vunpack.c.l.b16 %v6759
  %v7696 = vunpack.c.h.b16 %v6759
  %v7697 = vunpack.c.l.b16 %v6760
  %v7698 = vunpack.c.h.b16 %v6760
  %v7699 = vunpack.c.l.b16 %v6761
  %v7700 = vunpack.c.h.b16 %v6761
  %v7701 = vunpack.c.l.b16 %v6762
  %v7702 = vunpack.c.h.b16 %v6762
  %v7703 = vunpack.c.l.b16 %v6763
  %v7704 = vunpack.c.h.b16 %v6763
  %v7705 = vunpack.c.l.b16 %v6764
  %v7706 = vunpack.c.h.b16 %v6764
  %v7707 = vunpack.c.l.b16 %v6765
  %v7708 = vunpack.c.l.b16 %v6766
  %v7709 = vunpack.c.h.b16 %v6766
  %v7710 = vunpack.c.l.b16 %v6767
  %v7711 = vunpack.c.h.b16 %v6767
  %v7712 = vunpack.c.l.b16 %v6768
  %v7713 = vunpack.c.h.b16 %v6768
  %v7714 = vunpack.c.l.b16 %v6769
  %v7715 = vunpack.c.h.b16 %v6769
  %v7716 = vunpack.c.l.b16 %v6770
  %v7717 = vunpack.c.h.b16 %v6770
  %v7718 = vunpack.c.l.b16 %v6771
  %v7719 = vunpack.c.h.b16 %v6771
  %v7720 = vunpack.c.l.b16 %v6772
  %v7721 = vunpack.c.h.b16 %v6772
  %v7722 = vunpack.c.l.b16 %v6773
  %v7723 = vunpack.c.l.b16 %v6774
  %v7724 = vunpack.c.h.b16 %v6774
  %v7725 = vunpack.c.l.b16 %v6775
  %v7726 = vunpack.c.h.b16 %v6775
  %v7727 = vunpack.c.l.b16 %v6776
  %v7728 = vunpack.c.h.b16 %v6776
  %v7729 = vunpack.c.l.b16 %v6777
  %v7730 = vunpack.c.h.b16 %v6777
  %v7731 = vunpack.c.l.b16 %v6778
  %v7732 = vunpack.c.h.b16 %v6778
  %v7733 = vunpack.c.l.b16 %v6779
  %v7734 = vunpack.c.h.b16 %v6779
  %v7735 = vunpack.c.l.b16 %v6780
  %v7736 = vunpack.c.h.b16 %v6780
  %v7737 = vunpack.c.l.b16 %v6781
  %v7738 = vunpack.c.l.b16 %v6782
  %v7739 = vunpack.c.h.b16 %v6782
  %v7740 = vunpack.c.l.b16 %v6783
  %v7741 = vunpack.c.h.b16 %v6783
  %v7742 = vunpack.c.l.b16 %v6784
  %v7743 = vunpack.c.h.b16 %v6784
  %v7744 = vunpack.c.l.b16 %v6785
  %v7745 = vunpack.c.h.b16 %v6785
  %v7746 = vunpack.c.l.b16 %v6786
  %v7747 = vunpack.c.h.b16 %v6786
  %v7748 = vunpack.c.l.b16 %v6787
  %v7749 = vunpack.c.h.b16 %v6787
  %v7750 = vunpack.c.l.b16 %v6788
  %v7751 = vunpack.c.h.b16 %v6788
  %v7752 = vunpack.c.l.b16 %v6789
  %v7753 = vunpack.c.l.b16 %v6790
  %v7754 = vunpack.c.h.b16 %v6790
  %v7755 = vunpack.c.l.b16 %v6791
  %v7756 = vunpack.c.h.b16 %v6791
  %v7757 = vunpack.c.l.b16 %v6792
  %v7758 = vunpack.c.h.b16 %v6792
  %v7759 = vunpack.c.l.b16 %v6793
  %v7760 = vunpack.c.h.b16 %v6793
  %v7761 = vunpack.c.l.b16 %v6794
  %v7762 = vunpack.c.h.b16 %v6794
  %v7763 = vunpack.c.l.b16 %v6795
  %v7764 = vunpack.c.h.b16 %v6795
  %v7765 = vunpack.c.l.b16 %v6796
  %v7766 = vunpack.c.h.b16 %v6796
  %v7767 = vunpack.c.l.b16 %v6797
  %v7768 = vunpack.c.l.b16 %v6798
  %v7769 = vunpack.c.h.b16 %v6798
  %v7770 = vunpack.c.l.b16 %v6799
  %v7771 = vunpack.c.h.b16 %v6799
  %v7772 = vunpack.c.l.b16 %v6800
  %v7773 = vunpack.c.h.b16 %v6800
  %v7774 = vunpack.c.l.b16 %v6801
  %v7775 = vunpack.c.h.b16 %v6801
  %v7776 = vunpack.c.l.b16 %v6802
  %v7777 = vunpack.c.h.b16 %v6802
  %v7778 = vunpack.c.l.b16 %v6803
  %v7779 = vunpack.c.h.b16 %v6803
  %v7780 = vunpack.c.l.b16 %v6804
  %v7781 = vunpack.c.h.b16 %v6804
  %v7782 = vunpack.c.l.b16 %v6805
  %v7783 = vunpack.c.l.b16 %v6806
  %v7784 = vunpack.c.h.b16 %v6806
  %v7785 = vunpack.c.l.b16 %v6807
  %v7786 = vunpack.c.h.b16 %v6807
  %v7787 = vunpack.c.l.b16 %v6808
  %v7788 = vunpack.c.h.b16 %v6808
  %v7789 = vunpack.c.l.b16 %v6809
  %v7790 = vunpack.c.h.b16 %v6809
  %v7791 = vunpack.c.l.b16 %v6810
  %v7792 = vunpack.c.h.b16 %v6810
  %v7793 = vunpack.c.l.b16 %v6811
  %v7794 = vunpack.c.h.b16 %v6811
  %v7795 = vunpack.c.l.b16 %v6812
  %v7796 = vunpack.c.h.b16 %v6812
  %v7797 = vunpack.c.l.b16 %v6813
  %v7798 = vunpack.c.l.b16 %v6814
  %v7799 = vunpack.c.h.b16 %v6814
  %v7800 = vunpack.c.l.b16 %v6815
  %v7801 = vunpack.c.h.b16 %v6815
  %v7802 = vunpack.c.l.b16 %v6816
  %v7803 = vunpack.c.h.b16 %v6816
  %v7804 = vunpack.c.l.b16 %v6817
  %v7805 = vunpack.c.h.b16 %v6817
  %v7806 = vunpack.c.l.b16 %v6818
  %v7807 = vunpack.c.h.b16 %v6818
  %v7808 = vunpack.c.l.b16 %v6819
  %v7809 = vunpack.c.h.b16 %v6819
  %v7810 = vunpack.c.l.b16 %v6820
  %v7811 = vunpack.c.h.b16 %v6820
  %v7812 = vunpack.c.l.b16 %v6821
  %v7813 = vunpack.c.l.b16 %v6822
  %v7814 = vunpack.c.h.b16 %v6822
  %v7815 = vunpack.c.l.b16 %v6823
  %v7816 = vunpack.c.h.b16 %v6823
  %v7817 = vunpack.c.l.b16 %v6824
  %v7818 = vunpack.c.h.b16 %v6824
  %v7819 = vunpack.c.l.b16 %v6825
  %v7820 = vunpack.c.h.b16 %v6825
  %v7821 = vunpack.c.l.b16 %v6826
  %v7822 = vunpack.c.h.b16 %v6826
  %v7823 = vunpack.c.l.b16 %v6827
  %v7824 = vunpack.c.h.b16 %v6827
  %v7825 = vunpack.c.l.b16 %v6828
  %v7826 = vunpack.c.h.b16 %v6828
  %v7827 = vunpack.c.l.b16 %v6829
  %v7828 = vunpack.c.l.b16 %v6830
  %v7829 = vunpack.c.h.b16 %v6830
  %v7830 = vunpack.c.l.b16 %v6831
  %v7831 = vunpack.c.h.b16 %v6831
  %v7832 = vunpack.c.l.b16 %v6832
  %v7833 = vunpack.c.h.b16 %v6832
  %v7834 = vunpack.c.l.b16 %v6833
  %v7835 = vunpack.c.h.b16 %v6833
  %v7836 = vunpack.c.l.b16 %v6834
  %v7837 = vunpack.c.h.b16 %v6834
  %v7838 = vunpack.c.l.b16 %v6835
  %v7839 = vunpack.c.h.b16 %v6835
  %v7840 = vunpack.c.l.b16 %v6836
  %v7841 = vunpack.c.h.b16 %v6836
  %v7842 = vunpack.c.l.b16 %v6837
  %v7843 = vunpack.c.l.b16 %v6838
  %v7844 = vunpack.c.h.b16 %v6838
  %v7845 = vunpack.c.l.b16 %v6839
  %v7846 = vunpack.c.h.b16 %v6839
  %v7847 = vunpack.c.l.b16 %v6840
  %v7848 = vunpack.c.h.b16 %v6840
  %v7849 = vunpack.c.l.b16 %v6841
  %v7850 = vunpack.c.h.b16 %v6841
  %v7851 = vunpack.c.l.b16 %v6842
  %v7852 = vunpack.c.h.b16 %v6842
  %v7853 = vunpack.c.l.b16 %v6843
  %v7854 = vunpack.c.h.b16 %v6843
  %v7855 = vunpack.c.l.b16 %v6844
  %v7856 = vunpack.c.h.b16 %v6844
  %v7857 = vunpack.c.l.b16 %v6845
  %v7858 = vunpack.c.l.b16 %v6846
  %v7859 = vunpack.c.h.b16 %v6846
  %v7860 = vunpack.c.l.b16 %v6847
  %v7861 = vunpack.c.h.b16 %v6847
  %v7862 = vunpack.c.l.b16 %v6848
  %v7863 = vunpack.c.h.b16 %v6848
  %v7864 = vunpack.c.l.b16 %v6849
  %v7865 = vunpack.c.h.b16 %v6849
  %v7866 = vunpack.c.l.b16 %v6850
  %v7867 = vunpack.c.h.b16 %v6850
  %v7868 = vunpack.c.l.b16 %v6851
  %v7869 = vunpack.c.h.b16 %v6851
  %v7870 = vunpack.c.l.b16 %v6852
  %v7871 = vunpack.c.h.b16 %v6852
  %v7872 = vunpack.c.l.b16 %v6853
  %v7873 = vunpack.c.l.b16 %v6854
  %v7874 = vunpack.c.h.b16 %v6854
  %v7875 = vunpack.c.l.b16 %v6855
  %v7876 = vunpack.c.h.b16 %v6855
  %v7877 = vunpack.c.l.b16 %v6856
  %v7878 = vunpack.c.h.b16 %v6856
  %v7879 = vunpack.c.l.b16 %v6857
  %v7880 = vunpack.c.h.b16 %v6857
  %v7881 = vunpack.c.l.b16 %v6858
  %v7882 = vunpack.c.h.b16 %v6858
  %v7883 = vunpack.c.l.b16 %v6859
  %v7884 = vunpack.c.h.b16 %v6859
  %v7885 = vunpack.c.l.b16 %v6860
  %v7886 = vunpack.c.h.b16 %v6860
  %v7887 = vunpack.c.l.b16 %v6861
  %v7888 = vunpack.c.l.b16 %v6862
  %v7889 = vunpack.c.h.b16 %v6862
  %v7890 = vunpack.c.l.b16 %v6863
  %v7891 = vunpack.c.h.b16 %v6863
  %v7892 = vunpack.c.l.b16 %v6864
  %v7893 = vunpack.c.h.b16 %v6864
  %v7894 = vunpack.c.l.b16 %v6865
  %v7895 = vunpack.c.h.b16 %v6865
  %v7896 = vunpack.c.l.b16 %v6866
  %v7897 = vunpack.c.h.b16 %v6866
  %v7898 = vunpack.c.l.b16 %v6867
  %v7899 = vunpack.c.h.b16 %v6867
  %v7900 = vunpack.c.l.b16 %v6868
  %v7901 = vunpack.c.h.b16 %v6868
  %v7902 = vunpack.c.l.b16 %v6869
  %v7903 = vunpack.c.l.b16 %v6870
  %v7904 = vunpack.c.h.b16 %v6870
  %v7905 = vunpack.c.l.b16 %v6871
  %v7906 = vunpack.c.h.b16 %v6871
  %v7907 = vunpack.c.l.b16 %v6872
  %v7908 = vunpack.c.h.b16 %v6872
  %v7909 = vunpack.c.l.b16 %v6873
  %v7910 = vunpack.c.h.b16 %v6873
  %v7911 = vunpack.c.l.b16 %v6874
  %v7912 = vunpack.c.h.b16 %v6874
  %v7913 = vunpack.c.l.b16 %v6875
  %v7914 = vunpack.c.h.b16 %v6875
  %v7915 = vunpack.c.l.b16 %v6876
  %v7916 = vunpack.c.h.b16 %v6876
  %v7917 = vunpack.c.l.b16 %v6877
  %v7918 = vunpack.c.l.b16 %v6878
  %v7919 = vunpack.c.h.b16 %v6878
  %v7920 = vunpack.c.l.b16 %v6879
  %v7921 = vunpack.c.h.b16 %v6879
  %v7922 = vunpack.c.l.b16 %v6880
  %v7923 = vunpack.c.h.b16 %v6880
  %v7924 = vunpack.c.l.b16 %v6881
  %v7925 = vunpack.c.h.b16 %v6881
  %v7926 = vunpack.c.l.b16 %v6882
  %v7927 = vunpack.c.h.b16 %v6882
  %v7928 = vunpack.c.l.b16 %v6883
  %v7929 = vunpack.c.h.b16 %v6883
  %v7930 = vunpack.c.l.b16 %v6884
  %v7931 = vunpack.c.h.b16 %v6884
  %v7932 = vunpack.c.l.b16 %v6885
  %v7933 = vunpack.c.l.b16 %v6886
  %v7934 = vunpack.c.h.b16 %v6886
  %v7935 = vunpack.c.l.b16 %v6887
  %v7936 = vunpack.c.h.b16 %v6887
  %v7937 = vunpack.c.l.b16 %v6888
  %v7938 = vunpack.c.h.b16 %v6888
  %v7939 = vunpack.c.l.b16 %v6889
  %v7940 = vunpack.c.h.b16 %v6889
  %v7941 = vunpack.c.l.b16 %v6890
  %v7942 = vunpack.c.h.b16 %v6890
  %v7943 = vunpack.c.l.b16 %v6891
  %v7944 = vunpack.c.h.b16 %v6891
  %v7945 = vunpack.c.l.b16 %v6892
  %v7946 = vunpack.c.h.b16 %v6892
  %v7947 = vunpack.c.l.b16 %v6893
  %v7948 = vunpack.c.l.b16 %v6894
  %v7949 = vunpack.c.h.b16 %v6894
  %v7950 = vunpack.c.l.b16 %v6895
  %v7951 = vunpack.c.h.b16 %v6895
  %v7952 = vunpack.c.l.b16 %v6896
  %v7953 = vunpack.c.h.b16 %v6896
  %v7954 = vunpack.c.l.b16 %v6897
  %v7955 = vunpack.c.h.b16 %v6897
  %v7956 = vunpack.c.l.b16 %v6898
  %v7957 = vunpack.c.h.b16 %v6898
  %v7958 = vunpack.c.l.b16 %v6899
  %v7959 = vunpack.c.h.b16 %v6899
  %v7960 = vunpack.c.l.b16 %v6900
  %v7961 = vunpack.c.h.b16 %v6900
  %v7962 = vunpack.c.l.b16 %v6901
  %v7963 = vunpack.c.l.b16 %v6902
  %v7964 = vunpack.c.h.b16 %v6902
  %v7965 = vunpack.c.l.b16 %v6903
  %v7966 = vunpack.c.h.b16 %v6903
  %v7967 = vunpack.c.l.b16 %v6904
  %v7968 = vunpack.c.h.b16 %v6904
  %v7969 = vunpack.c.l.b16 %v6905
  %v7970 = vunpack.c.h.b16 %v6905
  %v7971 = vunpack.c.l.b16 %v6906
  %v7972 = vunpack.c.h.b16 %v6906
  %v7973 = vunpack.c.l.b16 %v6907
  %v7974 = vunpack.c.h.b16 %v6907
  %v7975 = vunpack.c.l.b16 %v6908
  %v7976 = vunpack.c.h.b16 %v6908
  %v7977 = vunpack.c.l.b16 %v6909
  %v7978 = vunpack.c.l.b16 %v6910
  %v7979 = vunpack.c.h.b16 %v6910
  %v7980 = vunpack.c.l.b16 %v6911
  %v7981 = vunpack.c.h.b16 %v6911
  %v7982 = vunpack.c.l.b16 %v6912
  %v7983 = vunpack.c.h.b16 %v6912
  %v7984 = vunpack.c.l.b16 %v6913
  %v7985 = vunpack.c.h.b16 %v6913
  %v7986 = vunpack.c.l.b16 %v6914
  %v7987 = vunpack.c.h.b16 %v6914
  %v7988 = vunpack.c.l.b16 %v6915
  %v7989 = vunpack.c.h.b16 %v6915
  %v7990 = vunpack.c.l.b16 %v6916
  %v7991 = vunpack.c.h.b16 %v6916
  %v7992 = vunpack.c.l.b16 %v6917
  %v7993 = vunpack.c.l.b16 %v6918
  %v7994 = vunpack.c.h.b16 %v6918
  %v7995 = vunpack.c.l.b16 %v6919
  %v7996 = vunpack.c.h.b16 %v6919
  %v7997 = vunpack.c.l.b16 %v6920
  %v7998 = vunpack.c.h.b16 %v6920
  %v7999 = vunpack.c.l.b16 %v6921
  %v8000 = vunpack.c.h.b16 %v6921
  %v8001 = vunpack.c.l.b16 %v6922
  %v8002 = vunpack.c.h.b16 %v6922
  %v8003 = vunpack.c.l.b16 %v6923
  %v8004 = vunpack.c.h.b16 %v6923
  %v8005 = vunpack.c.l.b16 %v6924
  %v8006 = vunpack.c.h.b16 %v6924
  %v8007 = vunpack.c.l.b16 %v6925
  %v8008 = vunpack.c.l.b16 %v6926
  %v8009 = vunpack.c.h.b16 %v6926
  %v8010 = vunpack.c.l.b16 %v6927
  %v8011 = vunpack.c.h.b16 %v6927
  %v8012 = vunpack.c.l.b16 %v6928
  %v8013 = vunpack.c.h.b16 %v6928
  %v8014 = vunpack.c.l.b16 %v6929
  %v8015 = vunpack.c.h.b16 %v6929
  %v8016 = vunpack.c.l.b16 %v6930
  %v8017 = vunpack.c.h.b16 %v6930
  %v8018 = vunpack.c.l.b16 %v6931
  %v8019 = vunpack.c.h.b16 %v6931
  %v8020 = vunpack.c.l.b16 %v6932
  %v8021 = vunpack.c.h.b16 %v6932
  %v8022 = vunpack.c.l.b16 %v6933
  %v8023 = vunpack.c.l.b16 %v6934
  %v8024 = vunpack.c.h.b16 %v6934
  %v8025 = vunpack.c.l.b16 %v6935
  %v8026 = vunpack.c.h.b16 %v6935
  %v8027 = vunpack.c.l.b16 %v6936
  %v8028 = vunpack.c.h.b16 %v6936
  %v8029 = vunpack.c.l.b16 %v6937
  %v8030 = vunpack.c.h.b16 %v6937
  %v8031 = vunpack.c.l.b16 %v6938
  %v8032 = vunpack.c.h.b16 %v6938
  %v8033 = vunpack.c.l.b16 %v6939
  %v8034 = vunpack.c.h.b16 %v6939
  %v8035 = vunpack.c.l.b16 %v6940
  %v8036 = vunpack.c.h.b16 %v6940
  %v8037 = vunpack.c.l.b16 %v6941
  %v8038 = vunpack.c.l.b16 %v6942
  %v8039 = vunpack.c.h.b16 %v6942
  %v8040 = vunpack.c.l.b16 %v6943
  %v8041 = vunpack.c.h.b16 %v6943
  %v8042 = vunpack.c.l.b16 %v6944
  %v8043 = vunpack.c.h.b16 %v6944
  %v8044 = vunpack.c.l.b16 %v6945
  %v8045 = vunpack.c.h.b16 %v6945
  %v8046 = vunpack.c.l.b16 %v6946
  %v8047 = vunpack.c.h.b16 %v6946
  %v8048 = vunpack.c.l.b16 %v6947
  %v8049 = vunpack.c.h.b16 %v6947
  %v8050 = vunpack.c.l.b16 %v6948
  %v8051 = vunpack.c.h.b16 %v6948
  %v8052 = vunpack.c.l.b16 %v6949
  %v8053 = vunpack.c.l.b16 %v6950
  %v8054 = vunpack.c.h.b16 %v6950
  %v8055 = vunpack.c.l.b16 %v6951
  %v8056 = vunpack.c.h.b16 %v6951
  %v8057 = vunpack.c.l.b16 %v6952
  %v8058 = vunpack.c.h.b16 %v6952
  %v8059 = vunpack.c.l.b16 %v6953
  %v8060 = vunpack.c.h.b16 %v6953
  %v8061 = vunpack.c.l.b16 %v6954
  %v8062 = vunpack.c.h.b16 %v6954
  %v8063 = vunpack.c.l.b16 %v6955
  %v8064 = vunpack.c.h.b16 %v6955
  %v8065 = vunpack.c.l.b16 %v6956
  %v8066 = vunpack.c.h.b16 %v6956
  %v8067 = vunpack.c.l.b16 %v6957
  %v8068 = vunpack.c.l.b16 %v6958
  %v8069 = vunpack.c.h.b16 %v6958
  %v8070 = vunpack.c.l.b16 %v6959
  %v8071 = vunpack.c.h.b16 %v6959
  %v8072 = vunpack.c.l.b16 %v6960
  %v8073 = vunpack.c.h.b16 %v6960
  %v8074 = vunpack.c.l.b16 %v6961
  %v8075 = vunpack.c.h.b16 %v6961
  %v8076 = vunpack.c.l.b16 %v6962
  %v8077 = vunpack.c.h.b16 %v6962
  %v8078 = vunpack.c.l.b16 %v6963
  %v8079 = vunpack.c.h.b16 %v6963
  %v8080 = vunpack.c.l.b16 %v6964
  %v8081 = vunpack.c.h.b16 %v6964
  %v8082 = vunpack.c.l.b16 %v6965
  %v8083 = vunpack.c.l.b16 %v6966
  %v8084 = vunpack.c.h.b16 %v6966
  %v8085 = vunpack.c.l.b16 %v6967
  %v8086 = vunpack.c.h.b16 %v6967
  %v8087 = vunpack.c.l.b16 %v6968
  %v8088 = vunpack.c.h.b16 %v6968
  %v8089 = vunpack.c.l.b16 %v6969
  %v8090 = vunpack.c.h.b16 %v6969
  %v8091 = vunpack.c.l.b16 %v6970
  %v8092 = vunpack.c.h.b16 %v6970
  %v8093 = vunpack.c.l.b16 %v6971
  %v8094 = vunpack.c.h.b16 %v6971
  %v8095 = vunpack.c.l.b16 %v6972
  %v8096 = vunpack.c.h.b16 %v6972
  %v8097 = vunpack.c.l.b16 %v6973
  %v8098 = vunpack.c.l.b16 %v6974
  %v8099 = vunpack.c.h.b16 %v6974
  %v8100 = vunpack.c.l.b16 %v6975
  %v8101 = vunpack.c.h.b16 %v6975
  %v8102 = vunpack.c.l.b16 %v6976
  %v8103 = vunpack.c.h.b16 %v6976
  %v8104 = vunpack.c.l.b16 %v6977
  %v8105 = vunpack.c.h.b16 %v6977
  %v8106 = vunpack.c.l.b16 %v6978
  %v8107 = vunpack.c.h.b16 %v6978
  %v8108 = vunpack.c.l.b16 %v6979
  %v8109 = vunpack.c.h.b16 %v6979
  %v8110 = vunpack.c.l.b16 %v6980
  %v8111 = vunpack.c.h.b16 %v6980
  %v8112 = vunpack.c.l.b16 %v6981
  %v8113 = vunpack.c.l.b16 %v6982
  %v8114 = vunpack.c.h.b16 %v6982
  %v8115 = vunpack.c.l.b16 %v6983
  %v8116 = vunpack.c.h.b16 %v6983
  %v8117 = vunpack.c.l.b16 %v6984
  %v8118 = vunpack.c.h.b16 %v6984
  %v8119 = vunpack.c.l.b16 %v6985
  %v8120 = vunpack.c.h.b16 %v6985
  %v8121 = vunpack.c.l.b16 %v6986
  %v8122 = vunpack.c.h.b16 %v6986
  %v8123 = vunpack.c.l.b16 %v6987
  %v8124 = vunpack.c.h.b16 %v6987
  %v8125 = vunpack.c.l.b16 %v6988
  %v8126 = vunpack.c.h.b16 %v6988
  %v8127 = vunpack.c.l.b16 %v6989
  %v8128 = vunpack.c.l.b16 %v6990
  %v8129 = vunpack.c.h.b16 %v6990
  %v8130 = vunpack.c.l.b16 %v6991
  %v8131 = vunpack.c.h.b16 %v6991
  %v8132 = vunpack.c.l.b16 %v6992
  %v8133 = vunpack.c.h.b16 %v6992
  %v8134 = vunpack.c.l.b16 %v6993
  %v8135 = vunpack.c.h.b16 %v6993
  %v8136 = vunpack.c.l.b16 %v6994
  %v8137 = vunpack.c.h.b16 %v6994
  %v8138 = vunpack.c.l.b16 %v6995
  %v8139 = vunpack.c.h.b16 %v6995
  %v8140 = vunpack.c.l.b16 %v6996
  %v8141 = vunpack.c.h.b16 %v6996
  %v8142 = vunpack.c.l.b16 %v6997
  %v8143 = vunpack.c.l.b16 %v6998
  %v8144 = vunpack.c.h.b16 %v6998
  %v8145 = vunpack.c.l.b16 %v6999
  %v8146 = vunpack.c.h.b16 %v6999
  %v8147 = vunpack.c.l.b16 %v7000
  %v8148 = vunpack.c.h.b16 %v7000
  %v8149 = vunpack.c.l.b16 %v7001
  %v8150 = vunpack.c.h.b16 %v7001
  %v8151 = vunpack.c.l.b16 %v7002
  %v8152 = vunpack.c.h.b16 %v7002
  %v8153 = vunpack.c.l.b16 %v7003
  %v8154 = vunpack.c.h.b16 %v7003
  %v8155 = vunpack.c.l.b16 %v7004
  %v8156 = vunpack.c.h.b16 %v7004
  %v8157 = vunpack.c.l.b16 %v7005
  %v8158 = vunpack.c.l.b16 %v7006
  %v8159 = vunpack.c.h.b16 %v7006
  %v8160 = vunpack.c.l.b16 %v7007
  %v8161 = vunpack.c.h.b16 %v7007
  %v8162 = vunpack.c.l.b16 %v7008
  %v8163 = vunpack.c.h.b16 %v7008
  %v8164 = vunpack.c.l.b16 %v7009
  %v8165 = vunpack.c.h.b16 %v7009
  %v8166 = vunpack.c.l.b16 %v7010
  %v8167 = vunpack.c.h.b16 %v7010
  %v8168 = vunpack.c.l.b16 %v7011
  %v8169 = vunpack.c.h.b16 %v7011
  %v8170 = vunpack.c.l.b16 %v7012
  %v8171 = vunpack.c.h.b16 %v7012
  %v8172 = vunpack.c.l.b16 %v7013
  %v8173 = vunpack.c.l.b16 %v7014
  %v8174 = vunpack.c.h.b16 %v7014
  %v8175 = vunpack.c.l.b16 %v7015
  %v8176 = vunpack.c.h.b16 %v7015
  %v8177 = vunpack.c.l.b16 %v7016
  %v8178 = vunpack.c.h.b16 %v7016
  %v8179 = vunpack.c.l.b16 %v7017
  %v8180 = vunpack.c.h.b16 %v7017
  %v8181 = vunpack.c.l.b16 %v7018
  %v8182 = vunpack.c.h.b16 %v7018
  %v8183 = vunpack.c.l.b16 %v7019
  %v8184 = vunpack.c.h.b16 %v7019
  %v8185 = vunpack.c.l.b16 %v7020
  %v8186 = vunpack.c.h.b16 %v7020
  %v8187 = vunpack.c.l.b16 %v7021
  %v8188 = vunpack.c.l.b16 %v7022
  %v8189 = vunpack.c.h.b16 %v7022
  %v8190 = vunpack.c.l.b16 %v7023
  %v8191 = vunpack.c.h.b16 %v7023
  %v8192 = vunpack.c.l.b16 %v7024
  %v8193 = vunpack.c.h.b16 %v7024
  %v8194 = vunpack.c.l.b16 %v7025
  %v8195 = vunpack.c.h.b16 %v7025
  %v8196 = vunpack.c.l.b16 %v7026
  %v8197 = vunpack.c.h.b16 %v7026
  %v8198 = vunpack.c.l.b16 %v7027
  %v8199 = vunpack.c.h.b16 %v7027
  %v8200 = vunpack.c.l.b16 %v7028
  %v8201 = vunpack.c.h.b16 %v7028
  %v8202 = vunpack.c.l.b16 %v7029
  %v8203 = vunpack.c.l.b16 %v7030
  %v8204 = vunpack.c.h.b16 %v7030
  %v8205 = vunpack.c.l.b16 %v7031
  %v8206 = vunpack.c.h.b16 %v7031
  %v8207 = vunpack.c.l.b16 %v7032
  %v8208 = vunpack.c.h.b16 %v7032
  %v8209 = vunpack.c.l.b16 %v7033
  %v8210 = vunpack.c.h.b16 %v7033
  %v8211 = vunpack.c.l.b16 %v7034
  %v8212 = vunpack.c.h.b16 %v7034
  %v8213 = vunpack.c.l.b16 %v7035
  %v8214 = vunpack.c.h.b16 %v7035
  %v8215 = vunpack.c.l.b16 %v7036
  %v8216 = vunpack.c.h.b16 %v7036
  %v8217 = vunpack.c.l.b16 %v7037
  %v8218 = vunpack.c.l.b16 %v7038
  %v8219 = vunpack.c.h.b16 %v7038
  %v8220 = vunpack.c.l.b16 %v7039
  %v8221 = vunpack.c.h.b16 %v7039
  %v8222 = vunpack.c.l.b16 %v7040
  %v8223 = vunpack.c.h.b16 %v7040
  %v8224 = vunpack.c.l.b16 %v7041
  %v8225 = vunpack.c.h.b16 %v7041
  %v8226 = vunpack.c.l.b16 %v7042
  %v8227 = vunpack.c.h.b16 %v7042
  %v8228 = vunpack.c.l.b16 %v7043
  %v8229 = vunpack.c.h.b16 %v7043
  %v8230 = vunpack.c.l.b16 %v7044
  %v8231 = vunpack.c.h.b16 %v7044
  %v8232 = vunpack.c.l.b16 %v7045
  %v8233 = vunpack.c.l.b16 %v7046
  %v8234 = vunpack.c.h.b16 %v7046
  %v8235 = vunpack.c.l.b16 %v7047
  %v8236 = vunpack.c.h.b16 %v7047
  %v8237 = vunpack.c.l.b16 %v7048
  %v8238 = vunpack.c.h.b16 %v7048
  %v8239 = vunpack.c.l.b16 %v7049
  %v8240 = vunpack.c.h.b16 %v7049
  %v8241 = vunpack.c.l.b16 %v7050
  %v8242 = vunpack.c.h.b16 %v7050
  %v8243 = vunpack.c.l.b16 %v7051
  %v8244 = vunpack.c.h.b16 %v7051
  %v8245 = vunpack.c.l.b16 %v7052
  %v8246 = vunpack.c.h.b16 %v7052
  %v8247 = vunpack.c.l.b16 %v7053
  %v8248 = vunpack.c.l.b16 %v7054
  %v8249 = vunpack.c.h.b16 %v7054
  %v8250 = vunpack.c.l.b16 %v7055
  %v8251 = vunpack.c.h.b16 %v7055
  %v8252 = vunpack.c.l.b16 %v7056
  %v8253 = vunpack.c.h.b16 %v7056
  %v8254 = vunpack.c.l.b16 %v7057
  %v8255 = vunpack.c.h.b16 %v7057
  %v8256 = vunpack.c.l.b16 %v7058
  %v8257 = vunpack.c.h.b16 %v7058
  %v8258 = vunpack.c.l.b16 %v7059
  %v8259 = vunpack.c.h.b16 %v7059
  %v8260 = vunpack.c.l.b16 %v7060
  %v8261 = vunpack.c.h.b16 %v7060
  %v8262 = vunpack.c.l.b16 %v7061
  %v8263 = vunpack.c.l.b16 %v7062
  %v8264 = vunpack.c.h.b16 %v7062
  %v8265 = vunpack.c.l.b16 %v7063
  %v8266 = vunpack.c.h.b16 %v7063
  %v8267 = vunpack.c.l.b16 %v7064
  %v8268 = vunpack.c.h.b16 %v7064
  %v8269 = vunpack.c.l.b16 %v7065
  %v8270 = vunpack.c.h.b16 %v7065
  %v8271 = vunpack.c.l.b16 %v7066
  %v8272 = vunpack.c.h.b16 %v7066
  %v8273 = vunpack.c.l.b16 %v7067
  %v8274 = vunpack.c.h.b16 %v7067
  %v8275 = vunpack.c.l.b16 %v7068
  %v8276 = vunpack.c.h.b16 %v7068
  %v8277 = vunpack.c.l.b16 %v7069
  %v8278 = vunpack.c.l.b16 %v7070
  %v8279 = vunpack.c.h.b16 %v7070
  %v8280 = vunpack.c.l.b16 %v7071
  %v8281 = vunpack.c.h.b16 %v7071
  %v8282 = vunpack.c.l.b16 %v7072
  %v8283 = vunpack.c.h.b16 %v7072
  %v8284 = vunpack.c.l.b16 %v7073
  %v8285 = vunpack.c.h.b16 %v7073
  %v8286 = vunpack.c.l.b16 %v7074
  %v8287 = vunpack.c.h.b16 %v7074
  %v8288 = vunpack.c.l.b16 %v7075
  %v8289 = vunpack.c.h.b16 %v7075
  %v8290 = vunpack.c.l.b16 %v7076
  %v8291 = vunpack.c.h.b16 %v7076
  %v8292 = vunpack.c.l.b16 %v7077
  %v8293 = vunpack.c.l.b16 %v7078
  %v8294 = vunpack.c.h.b16 %v7078
  %v8295 = vunpack.c.l.b16 %v7079
  %v8296 = vunpack.c.h.b16 %v7079
  %v8297 = vunpack.c.l.b16 %v7080
  %v8298 = vunpack.c.h.b16 %v7080
  %v8299 = vunpack.c.l.b16 %v7081
  %v8300 = vunpack.c.h.b16 %v7081
  %v8301 = vunpack.c.l.b16 %v7082
  %v8302 = vunpack.c.h.b16 %v7082
  %v8303 = vunpack.c.l.b16 %v7083
  %v8304 = vunpack.c.h.b16 %v7083
  %v8305 = vunpack.c.l.b16 %v7084
  %v8306 = vunpack.c.h.b16 %v7084
  %v8307 = vunpack.c.l.b16 %v7085
  %v8308 = vunpack.c.l.b16 %v7086
  %v8309 = vunpack.c.h.b16 %v7086
  %v8310 = vunpack.c.l.b16 %v7087
  %v8311 = vunpack.c.h.b16 %v7087
  %v8312 = vunpack.c.l.b16 %v7088
  %v8313 = vunpack.c.h.b16 %v7088
  %v8314 = vunpack.c.l.b16 %v7089
  %v8315 = vunpack.c.h.b16 %v7089
  %v8316 = vunpack.c.l.b16 %v7090
  %v8317 = vunpack.c.h.b16 %v7090
  %v8318 = vunpack.c.l.b16 %v7091
  %v8319 = vunpack.c.h.b16 %v7091
  %v8320 = vunpack.c.l.b16 %v7092
  %v8321 = vunpack.c.h.b16 %v7092
  %v8322 = vunpack.c.l.b16 %v7093
  %v8323 = vpack.c.b16 %v7588, %v7573
  %v8324 = vpack.c.b16 %v7589, %v7574
  %v8325 = vpack.c.b16 %v7590, %v7575
  %v8326 = vpack.c.b16 %v7591, %v7576
  %v8327 = vpack.c.b16 %v7592, %v7577
  %v8328 = vpack.c.b16 %v7593, %v7578
  %v8329 = vpack.c.b16 %v7594, %v7579
  %v8330 = vpack.c.b16 %v7595, %v7580
  %v8331 = vpack.c.b16 %v7596, %v7581
  %v8332 = vpack.c.b16 %v7597, %v7582
  %v8333 = vpack.c.b16 %v7598, %v7583
  %v8334 = vpack.c.b16 %v7599, %v7584
  %v8335 = vpack.c.b16 %v7600, %v7585
  %v8336 = vpack.c.b16 %v7601, %v7586
  %v8337 = vpack.c.b16 %v7602, %v7587
  %v8338 = vpack.c.b16 %v7618, %v7603
  %v8339 = vpack.c.b16 %v7619, %v7604
  %v8340 = vpack.c.b16 %v7620, %v7605
  %v8341 = vpack.c.b16 %v7621, %v7606
  %v8342 = vpack.c.b16 %v7622, %v7607
  %v8343 = vpack.c.b16 %v7623, %v7608
  %v8344 = vpack.c.b16 %v7624, %v7609
  %v8345 = vpack.c.b16 %v7625, %v7610
  %v8346 = vpack.c.b16 %v7626, %v7611
  %v8347 = vpack.c.b16 %v7627, %v7612
  %v8348 = vpack.c.b16 %v7628, %v7613
  %v8349 = vpack.c.b16 %v7629, %v7614
  %v8350 = vpack.c.b16 %v7630, %v7615
  %v8351 = vpack.c.b16 %v7631, %v7616
  %v8352 = vpack.c.b16 %v7632, %v7617
  %v8353 = vpack.c.b16 %v7648, %v7633
  %v8354 = vpack.c.b16 %v7649, %v7634
  %v8355 = vpack.c.b16 %v7650, %v7635
  %v8356 = vpack.c.b16 %v7651, %v7636
  %v8357 = vpack.c.b16 %v7652, %v7637
  %v8358 = vpack.c.b16 %v7653, %v7638
  %v8359 = vpack.c.b16 %v7654, %v7639
  %v8360 = vpack.c.b16 %v7655, %v7640
  %v8361 = vpack.c.b16 %v7656, %v7641
  %v8362 = vpack.c.b16 %v7657, %v7642
  %v8363 = vpack.c.b16 %v7658, %v7643
  %v8364 = vpack.c.b16 %v7659, %v7644
  %v8365 = vpack.c.b16 %v7660, %v7645
  %v8366 = vpack.c.b16 %v7661, %v7646
  %v8367 = vpack.c.b16 %v7662, %v7647
  %v8368 = vpack.c.b16 %v7678, %v7663
  %v8369 = vpack.c.b16 %v7679, %v7664
  %v8370 = vpack.c.b16 %v7680, %v7665
  %v8371 = vpack.c.b16 %v7681, %v7666
  %v8372 = vpack.c.b16 %v7682, %v7667
  %v8373 = vpack.c.b16 %v7683, %v7668
  %v8374 = vpack.c.b16 %v7684, %v7669
  %v8375 = vpack.c.b16 %v7685, %v7670
  %v8376 = vpack.c.b16 %v7686, %v7671
  %v8377 = vpack.c.b16 %v7687, %v7672
  %v8378 = vpack.c.b16 %v7688, %v7673
  %v8379 = vpack.c.b16 %v7689, %v7674
  %v8380 = vpack.c.b16 %v7690, %v7675
  %v8381 = vpack.c.b16 %v7691, %v7676
  %v8382 = vpack.c.b16 %v7692, %v7677
  %v8383 = vpack.c.b16 %v7708, %v7693
  %v8384 = vpack.c.b16 %v7709, %v7694
  %v8385 = vpack.c.b16 %v7710, %v7695
  %v8386 = vpack.c.b16 %v7711, %v7696
  %v8387 = vpack.c.b16 %v7712, %v7697
  %v8388 = vpack.c.b16 %v7713, %v7698
  %v8389 = vpack.c.b16 %v7714, %v7699
  %v8390 = vpack.c.b16 %v7715, %v7700
  %v8391 = vpack.c.b16 %v7716, %v7701
  %v8392 = vpack.c.b16 %v7717, %v7702
  %v8393 = vpack.c.b16 %v7718, %v7703
  %v8394 = vpack.c.b16 %v7719, %v7704
  %v8395 = vpack.c.b16 %v7720, %v7705
  %v8396 = vpack.c.b16 %v7721, %v7706
  %v8397 = vpack.c.b16 %v7722, %v7707
  %v8398 = vpack.c.b16 %v7738, %v7723
  %v8399 = vpack.c.b16 %v7739, %v7724
  %v8400 = vpack.c.b16 %v7740, %v7725
  %v8401 = vpack.c.b16 %v7741, %v7726
  %v8402 = vpack.c.b16 %v7742, %v7727
  %v8403 = vpack.c.b16 %v7743, %v7728
  %v8404 = vpack.c.b16 %v7744, %v7729
  %v8405 = vpack.c.b16 %v7745, %v7730
  %v8406 = vpack.c.b16 %v7746, %v7731
  %v8407 = vpack.c.b16 %v7747, %v7732
  %v8408 = vpack.c.b16 %v7748, %v7733
  %v8409 = vpack.c.b16 %v7749, %v7734
  %v8410 = vpack.c.b16 %v7750, %v7735
  %v8411 = vpack.c.b16 %v7751, %v7736
  %v8412 = vpack.c.b16 %v7752, %v7737
  %v8413 = vpack.c.b16 %v7768, %v7753
  %v8414 = vpack.c.b16 %v7769, %v7754
  %v8415 = vpack.c.b16 %v7770, %v7755
  %v8416 = vpack.c.b16 %v7771, %v7756
  %v8417 = vpack.c.b16 %v7772, %v7757
  %v8418 = vpack.c.b16 %v7773, %v7758
  %v8419 = vpack.c.b16 %v7774, %v7759
  %v8420 = vpack.c.b16 %v7775, %v7760
  %v8421 = vpack.c.b16 %v7776, %v7761
  %v8422 = vpack.c.b16 %v7777, %v7762
  %v8423 = vpack.c.b16 %v7778, %v7763
  %v8424 = vpack.c.b16 %v7779, %v7764
  %v8425 = vpack.c.b16 %v7780, %v7765
  %v8426 = vpack.c.b16 %v7781, %v7766
  %v8427 = vpack.c.b16 %v7782, %v7767
  %v8428 = vpack.c.b16 %v7798, %v7783
  %v8429 = vpack.c.b16 %v7799, %v7784
  %v8430 = vpack.c.b16 %v7800, %v7785
  %v8431 = vpack.c.b16 %v7801, %v7786
  %v8432 = vpack.c.b16 %v7802, %v7787
  %v8433 = vpack.c.b16 %v7803, %v7788
  %v8434 = vpack.c.b16 %v7804, %v7789
  %v8435 = vpack.c.b16 %v7805, %v7790
  %v8436 = vpack.c.b16 %v7806, %v7791
  %v8437 = vpack.c.b16 %v7807, %v7792
  %v8438 = vpack.c.b16 %v7808, %v7793
  %v8439 = vpack.c.b16 %v7809, %v7794
  %v8440 = vpack.c.b16 %v7810, %v7795
  %v8441 = vpack.c.b16 %v7811, %v7796
  %v8442 = vpack.c.b16 %v7812, %v7797
  %v8443 = vpack.c.b16 %v7828, %v7813
  %v8444 = vpack.c.b16 %v7829, %v7814
  %v8445 = vpack.c.b16 %v7830, %v7815
  %v8446 = vpack.c.b16 %v7831, %v7816
  %v8447 = vpack.c.b16 %v7832, %v7817
  %v8448 = vpack.c.b16 %v7833, %v7818
  %v8449 = vpack.c.b16 %v7834, %v7819
  %v8450 = vpack.c.b16 %v7835, %v7820
  %v8451 = vpack.c.b16 %v7836, %v7821
  %v8452 = vpack.c.b16 %v7837, %v7822
  %v8453 = vpack.c.b16 %v7838, %v7823
  %v8454 = vpack.c.b16 %v7839, %v7824
  %v8455 = vpack.c.b16 %v7840, %v7825
  %v8456 = vpack.c.b16 %v7841, %v7826
  %v8457 = vpack.c.b16 %v7842, %v7827
  %v8458 = vpack.c.b16 %v7858, %v7843
  %v8459 = vpack.c.b16 %v7859, %v7844
  %v8460 = vpack.c.b16 %v7860, %v7845
  %v8461 = vpack.c.b16 %v7861, %v7846
  %v8462 = vpack.c.b16 %v7862, %v7847
  %v8463 = vpack.c.b16 %v7863, %v7848
  %v8464 = vpack.c.b16 %v7864, %v7849
  %v8465 = vpack.c.b16 %v7865, %v7850
  %v8466 = vpack.c.b16 %v7866, %v7851
  %v8467 = vpack.c.b16 %v7867, %v7852
  %v8468 = vpack.c.b16 %v7868, %v7853
  %v8469 = vpack.c.b16 %v7869, %v7854
  %v8470 = vpack.c.b16 %v7870, %v7855
  %v8471 = vpack.c.b16 %v7871, %v7856
  %v8472 = vpack.c.b16 %v7872, %v7857
  %v8473 = vpack.c.b16 %v7888, %v7873
  %v8474 = vpack.c.b16 %v7889, %v7874
  %v8475 = vpack.c.b16 %v7890, %v7875
  %v8476 = vpack.c.b16 %v7891, %v7876
  %v8477 = vpack.c.b16 %v7892, %v7877
  %v8478 = vpack.c.b16 %v7893, %v7878
  %v8479 = vpack.c.b16 %v7894, %v7879
  %v8480 = vpack.c.b16 %v7895, %v7880
  %v8481 = vpack.c.b16 %v7896, %v7881
  %v8482 = vpack.c.b16 %v7897, %v7882
  %v8483 = vpack.c.b16 %v7898, %v7883
  %v8484 = vpack.c.b16 %v7899, %v7884
  %v8485 = vpack.c.b16 %v7900, %v7885
  %v8486 = vpack.c.b16 %v7901, %v7886
  %v8487 = vpack.c.b16 %v7902, %v7887
  %v8488 = vpack.c.b16 %v7918, %v7903
  %v8489 = vpack.c.b16 %v7919, %v7904
  %v8490 = vpack.c.b16 %v7920, %v7905
  %v8491 = vpack.c.b16 %v7921, %v7906
  %v8492 = vpack.c.b16 %v7922, %v7907
  %v8493 = vpack.c.b16 %v7923, %v7908
  %v8494 = vpack.c.b16 %v7924, %v7909
  %v8495 = vpack.c.b16 %v7925, %v7910
  %v8496 = vpack.c.b16 %v7926, %v7911
  %v8497 = vpack.c.b16 %v7927, %v7912
  %v8498 = vpack.c.b16 %v7928, %v7913
  %v8499 = vpack.c.b16 %v7929, %v7914
  %v8500 = vpack.c.b16 %v7930, %v7915
  %v8501 = vpack.c.b16 %v7931, %v7916
  %v8502 = vpack.c.b16 %v7932, %v7917
  %v8503 = vpack.c.b16 %v7948, %v7933
  %v8504 = vpack.c.b16 %v7949, %v7934
  %v8505 = vpack.c.b16 %v7950, %v7935
  %v8506 = vpack.c.b16 %v7951, %v7936
  %v8507 = vpack.c.b16 %v7952, %v7937
  %v8508 = vpack.c.b16 %v7953, %v7938
  %v8509 = vpack.c.b16 %v7954, %v7939
  %v8510 = vpack.c.b16 %v7955, %v7940
  %v8511 = vpack.c.b16 %v7956, %v7941
  %v8512 = vpack.c.b16 %v7957, %v7942
  %v8513 = vpack.c.b16 %v7958, %v7943
  %v8514 = vpack.c.b16 %v7959, %v7944
  %v8515 = vpack.c.b16 %v7960, %v7945
  %v8516 = vpack.c.b16 %v7961, %v7946
  %v8517 = vpack.c.b16 %v7962, %v7947
  %v8518 = vpack.c.b16 %v7978, %v7963
  %v8519 = vpack.c.b16 %v7979, %v7964
  %v8520 = vpack.c.b16 %v7980, %v7965
  %v8521 = vpack.c.b16 %v7981, %v7966
  %v8522 = vpack.c.b16 %v7982, %v7967
  %v8523 = vpack.c.b16 %v7983, %v7968
  %v8524 = vpack.c.b16 %v7984, %v7969
  %v8525 = vpack.c.b16 %v7985, %v7970
  %v8526 = vpack.c.b16 %v7986, %v7971
  %v8527 = vpack.c.b16 %v7987, %v7972
  %v8528 = vpack.c.b16 %v7988, %v7973
  %v8529 = vpack.c.b16 %v7989, %v7974
  %v8530 = vpack.c.b16 %v7990, %v7975
  %v8531 = vpack.c.b16 %v7991, %v7976
  %v8532 = vpack.c.b16 %v7992, %v7977
  %v8533 = vpack.c.b16 %v8008, %v7993
  %v8534 = vpack.c.b16 %v8009, %v7994
  %v8535 = vpack.c.b16 %v8010, %v7995
  %v8536 = vpack.c.b16 %v8011, %v7996
  %v8537 = vpack.c.b16 %v8012, %v7997
  %v8538 = vpack.c.b16 %v8013, %v7998
  %v8539 = vpack.c.b16 %v8014, %v7999
  %v8540 = vpack.c.b16 %v8015, %v8000
  %v8541 = vpack.c.b16 %v8016, %v8001
  %v8542 = vpack.c.b16 %v8017, %v8002
  %v8543 = vpack.c.b16 %v8018, %v8003
  %v8544 = vpack.c.b16 %v8019, %v8004
  %v8545 = vpack.c.b16 %v8020, %v8005
  %v8546 = vpack.c.b16 %v8021, %v8006
  %v8547 = vpack.c.b16 %v8022, %v8007
  %v8548 = vpack.c.b16 %v8038, %v8023
  %v8549 = vpack.c.b16 %v8039, %v8024
  %v8550 = vpack.c.b16 %v8040, %v8025
  %v8551 = vpack.c.b16 %v8041, %v8026
  %v8552 = vpack.c.b16 %v8042, %v8027
  %v8553 = vpack.c.b16 %v8043, %v8028
  %v8554 = vpack.c.b16 %v8044, %v8029
  %v8555 = vpack.c.b16 %v8045, %v8030
  %v8556 = vpack.c.b16 %v8046, %v8031
  %v8557 = vpack.c.b16 %v8047, %v8032
  %v8558 = vpack.c.b16 %v8048, %v8033
  %v8559 = vpack.c.b16 %v8049, %v8034
  %v8560 = vpack.c.b16 %v8050, %v8035
  %v8561 = vpack.c.b16 %v8051, %v8036
  %v8562 = vpack.c.b16 %v8052, %v8037
  %v8563 = vpack.c.b16 %v8068, %v8053
  %v8564 = vpack.c.b16 %v8069, %v8054
  %v8565 = vpack.c.b16 %v8070, %v8055
  %v8566 = vpack.c.b16 %v8071, %v8056
  %v8567 = vpack.c.b16 %v8072, %v8057
  %v8568 = vpack.c.b16 %v8073, %v8058
  %v8569 = vpack.c.b16 %v8074, %v8059
  %v8570 = vpack.c.b16 %v8075, %v8060
  %v8571 = vpack.c.b16 %v8076, %v8061
  %v8572 = vpack.c.b16 %v8077, %v8062
  %v8573 = vpack.c.b16 %v8078, %v8063
  %v8574 = vpack.c.b16 %v8079, %v8064
  %v8575 = vpack.c.b16 %v8080, %v8065
  %v8576 = vpack.c.b16 %v8081, %v8066
  %v8577 = vpack.c.b16 %v8082, %v8067
  %v8578 = vpack.c.b16 %v8098, %v8083
  %v8579 = vpack.c.b16 %v8099, %v8084
  %v8580 = vpack.c.b16 %v8100, %v8085
  %v8581 = vpack.c.b16 %v8101, %v8086
  %v8582 = vpack.c.b16 %v8102, %v8087
  %v8583 = vpack.c.b16 %v8103, %v8088
  %v8584 = vpack.c.b16 %v8104, %v8089
  %v8585 = vpack.c.b16 %v8105, %v8090
  %v8586 = vpack.c.b16 %v8106, %v8091
  %v8587 = vpack.c.b16 %v8107, %v8092
  %v8588 = vpack.c.b16 %v8108, %v8093
  %v8589 = vpack.c.b16 %v8109, %v8094
  %v8590 = vpack.c.b16 %v8110, %v8095
  %v8591 = vpack.c.b16 %v8111, %v8096
  %v8592 = vpack.c.b16 %v8112, %v8097
  %v8593 = vpack.c.b16 %v8128, %v8113
  %v8594 = vpack.c.b16 %v8129, %v8114
  %v8595 = vpack.c.b16 %v8130, %v8115
  %v8596 = vpack.c.b16 %v8131, %v8116
  %v8597 = vpack.c.b16 %v8132, %v8117
  %v8598 = vpack.c.b16 %v8133, %v8118
  %v8599 = vpack.c.b16 %v8134, %v8119
  %v8600 = vpack.c.b16 %v8135, %v8120
  %v8601 = vpack.c.b16 %v8136, %v8121
  %v8602 = vpack.c.b16 %v8137, %v8122
  %v8603 = vpack.c.b16 %v8138, %v8123
  %v8604 = vpack.c.b16 %v8139, %v8124
  %v8605 = vpack.c.b16 %v8140, %v8125
  %v8606 = vpack.c.b16 %v8141, %v8126
  %v8607 = vpack.c.b16 %v8142, %v8127
  %v8608 = vpack.c.b16 %v8158, %v8143
  %v8609 = vpack.c.b16 %v8159, %v8144
  %v8610 = vpack.c.b16 %v8160, %v8145
  %v8611 = vpack.c.b16 %v8161, %v8146
  %v8612 = vpack.c.b16 %v8162, %v8147
  %v8613 = vpack.c.b16 %v8163, %v8148
  %v8614 = vpack.c.b16 %v8164, %v8149
  %v8615 = vpack.c.b16 %v8165, %v8150
  %v8616 = vpack.c.b16 %v8166, %v8151
  %v8617 = vpack.c.b16 %v8167, %v8152
  %v8618 = vpack.c.b16 %v8168, %v8153
  %v8619 = vpack.c.b16 %v8169, %v8154
  %v8620 = vpack.c.b16 %v8170, %v8155
  %v8621 = vpack.c.b16 %v8171, %v8156
  %v8622 = vpack.c.b16 %v8172, %v8157
  %v8623 = vpack.c.b16 %v8188, %v8173
  %v8624 = vpack.c.b16 %v8189, %v8174
  %v8625 = vpack.c.b16 %v8190, %v8175
  %v8626 = vpack.c.b16 %v8191, %v8176
  %v8627 = vpack.c.b16 %v8192, %v8177
  %v8628 = vpack.c.b16 %v8193, %v8178
  %v8629 = vpack.c.b16 %v8194, %v8179
  %v8630 = vpack.c.b16 %v8195, %v8180
  %v8631 = vpack.c.b16 %v8196, %v8181
  %v8632 = vpack.c.b16 %v8197, %v8182
  %v8633 = vpack.c.b16 %v8198, %v8183
  %v8634 = vpack.c.b16 %v8199, %v8184
  %v8635 = vpack.c.b16 %v8200, %v8185
  %v8636 = vpack.c.b16 %v8201, %v8186
  %v8637 = vpack.c.b16 %v8202, %v8187
  %v8638 = vpack.c.b16 %v8218, %v8203
  %v8639 = vpack.c.b16 %v8219, %v8204
  %v8640 = vpack.c.b16 %v8220, %v8205
  %v8641 = vpack.c.b16 %v8221, %v8206
  %v8642 = vpack.c.b16 %v8222, %v8207
  %v8643 = vpack.c.b16 %v8223, %v8208
  %v8644 = vpack.c.b16 %v8224, %v8209
  %v8645 = vpack.c.b16 %v8225, %v8210
  %v8646 = vpack.c.b16 %v8226, %v8211
  %v8647 = vpack.c.b16 %v8227, %v8212
  %v8648 = vpack.c.b16 %v8228, %v8213
  %v8649 = vpack.c.b16 %v8229, %v8214
  %v8650 = vpack.c.b16 %v8230, %v8215
  %v8651 = vpack.c.b16 %v8231, %v8216
  %v8652 = vpack.c.b16 %v8232, %v8217
  %v8653 = vpack.c.b16 %v8248, %v8233
  %v8654 = vpack.c.b16 %v8249, %v8234
  %v8655 = vpack.c.b16 %v8250, %v8235
  %v8656 = vpack.c.b16 %v8251, %v8236
  %v8657 = vpack.c.b16 %v8252, %v8237
  %v8658 = vpack.c.b16 %v8253, %v8238
  %v8659 = vpack.c.b16 %v8254, %v8239
  %v8660 = vpack.c.b16 %v8255, %v8240
  %v8661 = vpack.c.b16 %v8256, %v8241
  %v8662 = vpack.c.b16 %v8257, %v8242
  %v8663 = vpack.c.b16 %v8258, %v8243
  %v8664 = vpack.c.b16 %v8259, %v8244
  %v8665 = vpack.c.b16 %v8260, %v8245
  %v8666 = vpack.c.b16 %v8261, %v8246
  %v8667 = vpack.c.b16 %v8262, %v8247
  %v8668 = vpack.c.b16 %v8278, %v8263
  %v8669 = vpack.c.b16 %v8279, %v8264
  %v8670 = vpack.c.b16 %v8280, %v8265
  %v8671 = vpack.c.b16 %v8281, %v8266
  %v8672 = vpack.c.b16 %v8282, %v8267
  %v8673 = vpack.c.b16 %v8283, %v8268
  %v8674 = vpack.c.b16 %v8284, %v8269
  %v8675 = vpack.c.b16 %v8285, %v8270
  %v8676 = vpack.c.b16 %v8286, %v8271
  %v8677 = vpack.c.b16 %v8287, %v8272
  %v8678 = vpack.c.b16 %v8288, %v8273
  %v8679 = vpack.c.b16 %v8289, %v8274
  %v8680 = vpack.c.b16 %v8290, %v8275
  %v8681 = vpack.c.b16 %v8291, %v8276
  %v8682 = vpack.c.b16 %v8292, %v8277
  %v8683 = vpack.c.b16 %v8308, %v8293
  %v8684 = vpack.c.b16 %v8309, %v8294
  %v8685 = vpack.c.b16 %v8310, %v8295
  %v8686 = vpack.c.b16 %v8311, %v8296
  %v8687 = vpack.c.b16 %v8312, %v8297
  %v8688 = vpack.c.b16 %v8313, %v8298
  %v8689 = vpack.c.b16 %v8314, %v8299
  %v8690 = vpack.c.b16 %v8315, %v8300
  %v8691 = vpack.c.b16 %v8316, %v8301
  %v8692 = vpack.c.b16 %v8317, %v8302
  %v8693 = vpack.c.b16 %v8318, %v8303
  %v8694 = vpack.c.b16 %v8319, %v8304
  %v8695 = vpack.c.b16 %v8320, %v8305
  %v8696 = vpack.c.b16 %v8321, %v8306
  %v8697 = vpack.c.b16 %v8322, %v8307
  %v9074 = vsel %vm1260, %v6693, 0
  %9076 = vmatprep.subr.bf16.mxu0 %v8324
  %9077 = vmatpush1.bf16.msra.mxu0 %v8323
  %9078 = vmatprep.subr.bf16.mxu0 %v8339
  %9079 = vmatpush1.bf16.msra.mxu0 %v8338
  %9080 = vmatprep.subr.bf16.mxu0 %v8354
  %9081 = vmatpush1.bf16.msra.mxu0 %v8353
  %9082 = vmatprep.subr.bf16.mxu0 %v8369
  %9083 = vmatpush1.bf16.msra.mxu0 %v8368
  %9084 = vmatprep.subr.bf16.mxu0 %v8384
  %9085 = vmatpush1.bf16.msra.mxu0 %v8383
  %9086 = vmatprep.subr.bf16.mxu0 %v8399
  %9087 = vmatpush1.bf16.msra.mxu0 %v8398
  %9088 = vmatprep.subr.bf16.mxu0 %v8414
  %9089 = vmatpush1.bf16.msra.mxu0 %v8413
  %9090 = vmatprep.subr.bf16.mxu0 %v8429
  %9091 = vmatpush1.bf16.msra.mxu0 %v8428
  %9092 = vmatprep.subr.bf16.mxu0 %v8444
  %9093 = vmatpush1.bf16.msra.mxu0 %v8443
  %9094 = vmatprep.subr.bf16.mxu0 %v8459
  %9095 = vmatpush1.bf16.msra.mxu0 %v8458
  %9096 = vmatprep.subr.bf16.mxu0 %v8474
  %9097 = vmatpush1.bf16.msra.mxu0 %v8473
  %9098 = vmatprep.subr.bf16.mxu0 %v8489
  %9099 = vmatpush1.bf16.msra.mxu0 %v8488
  %9100 = vmatprep.subr.bf16.mxu0 %v8504
  %9101 = vmatpush1.bf16.msra.mxu0 %v8503
  %9102 = vmatprep.subr.bf16.mxu0 %v8519
  %9103 = vmatpush1.bf16.msra.mxu0 %v8518
  %9104 = vmatprep.subr.bf16.mxu0 %v8534
  %9105 = vmatpush1.bf16.msra.mxu0 %v8533
  %9106 = vmatprep.subr.bf16.mxu0 %v8549
  %9107 = vmatpush1.bf16.msra.mxu0 %v8548
  %9108 = vmatprep.mubr.bf16.mxu0 %v6691
  %9109 = vmatmul.mubr.bf16.gmra.mrb[0].mxu0 %v6690
  %v9110 = vpop.f32.mrb[0].mxu0
  %v9111 = vadd.f32 %v7101, %v9110
  %v9112 = vpop.f32.mrb[0].mxu0
  %v9113 = vadd.f32 %v7105, %v9112
  %v9114 = vpop.f32.mrb[0].mxu0
  %v9115 = vpop.f32.mrb[0].mxu0
  %9116 = vdwg.mxu0
  %9117 = vmatprep.subr.bf16.mxu0 %v8564
  %9118 = vmatpush1.bf16.msra.mxu0 %v8563
  %9119 = vmatprep.subr.bf16.mxu0 %v8579
  %9120 = vmatpush1.bf16.msra.mxu0 %v8578
  %9121 = vmatprep.subr.bf16.mxu0 %v8594
  %9122 = vmatpush1.bf16.msra.mxu0 %v8593
  %9123 = vmatprep.subr.bf16.mxu0 %v8609
  %9124 = vmatpush1.bf16.msra.mxu0 %v8608
  %9125 = vmatprep.subr.bf16.mxu0 %v8624
  %9126 = vmatpush1.bf16.msra.mxu0 %v8623
  %9127 = vmatprep.subr.bf16.mxu0 %v8639
  %9128 = vmatpush1.bf16.msra.mxu0 %v8638
  %9129 = vmatprep.subr.bf16.mxu0 %v8654
  %9130 = vmatpush1.bf16.msra.mxu0 %v8653
  %9131 = vmatprep.subr.bf16.mxu0 %v8669
  %9132 = vmatpush1.bf16.msra.mxu0 %v8668
  %9133 = vmatprep.subr.bf16.mxu0 %v8684
  %9134 = vmatpush1.bf16.msra.mxu0 %v8683
  %9135 = vmatprep.subr.bf16.mxu0 0
  %9136 = vmatpush1.bf16.msra.mxu0 0
  %9137 = vmatprep.subr.bf16.mxu0 0
  %9138 = vmatpush1.bf16.msra.mxu0 0
  %9139 = vmatprep.subr.bf16.mxu0 0
  %9140 = vmatpush1.bf16.msra.mxu0 0
  %9141 = vmatprep.subr.bf16.mxu0 0
  %9142 = vmatpush1.bf16.msra.mxu0 0
  %9143 = vmatprep.subr.bf16.mxu0 0
  %9144 = vmatpush1.bf16.msra.mxu0 0
  %9145 = vmatprep.subr.bf16.mxu0 0
  %9146 = vmatpush1.bf16.msra.mxu0 0
  %9147 = vmatprep.subr.bf16.mxu0 0
  %9148 = vmatpush1.bf16.msra.mxu0 0
  %9149 = vmatprep.mubr.bf16.mxu0 %v9074
  %9150 = vmatmul.mubr.bf16.gmra.mrb[0].mxu0 %v6692
  %v9151 = vpop.f32.mrb[0].mxu0
  %v9152 = vadd.f32 %v9111, %v9151
  %v9153 = vpop.f32.mrb[0].mxu0
  %v9154 = vadd.f32 %v9113, %v9153
  %v9155 = vpop.f32.mrb[0].mxu0
  %v9156 = vpop.f32.mrb[0].mxu0
  %9157 = vdwg.mxu0
  %9158 = vmatprep.subr.bf16.mxu0 %v8326
  %9159 = vmatpush1.bf16.msra.mxu0 %v8325
  %9160 = vmatprep.subr.bf16.mxu0 %v8341
  %9161 = vmatpush1.bf16.msra.mxu0 %v8340
  %9162 = vmatprep.subr.bf16.mxu0 %v8356
  %9163 = vmatpush1.bf16.msra.mxu0 %v8355
  %9164 = vmatprep.subr.bf16.mxu0 %v8371
  %9165 = vmatpush1.bf16.msra.mxu0 %v8370
  %9166 = vmatprep.subr.bf16.mxu0 %v8386
  %9167 = vmatpush1.bf16.msra.mxu0 %v8385
  %9168 = vmatprep.subr.bf16.mxu0 %v8401
  %9169 = vmatpush1.bf16.msra.mxu0 %v8400
  %9170 = vmatprep.subr.bf16.mxu0 %v8416
  %9171 = vmatpush1.bf16.msra.mxu0 %v8415
  %9172 = vmatprep.subr.bf16.mxu0 %v8431
  %9173 = vmatpush1.bf16.msra.mxu0 %v8430
  %9174 = vmatprep.subr.bf16.mxu0 %v8446
  %9175 = vmatpush1.bf16.msra.mxu0 %v8445
  %9176 = vmatprep.subr.bf16.mxu0 %v8461
  %9177 = vmatpush1.bf16.msra.mxu0 %v8460
  %9178 = vmatprep.subr.bf16.mxu0 %v8476
  %9179 = vmatpush1.bf16.msra.mxu0 %v8475
  %9180 = vmatprep.subr.bf16.mxu0 %v8491
  %9181 = vmatpush1.bf16.msra.mxu0 %v8490
  %9182 = vmatprep.subr.bf16.mxu0 %v8506
  %9183 = vmatpush1.bf16.msra.mxu0 %v8505
  %9184 = vmatprep.subr.bf16.mxu0 %v8521
  %9185 = vmatpush1.bf16.msra.mxu0 %v8520
  %9186 = vmatprep.subr.bf16.mxu0 %v8536
  %9187 = vmatpush1.bf16.msra.mxu0 %v8535
  %9188 = vmatprep.subr.bf16.mxu0 %v8551
  %9189 = vmatpush1.bf16.msra.mxu0 %v8550
  %9190 = vmatprep.mubr.bf16.mxu0 %v6691
  %9191 = vmatmul.mubr.bf16.gmra.mrb[0].mxu0 %v6690
  %v9192 = vpop.f32.mrb[0].mxu0
  %v9193 = vadd.f32 %v7109, %v9192
  %v9194 = vpop.f32.mrb[0].mxu0
  %v9195 = vadd.f32 %v7113, %v9194
  %v9196 = vpop.f32.mrb[0].mxu0
  %v9197 = vpop.f32.mrb[0].mxu0
  %9198 = vdwg.mxu0
  %9199 = vmatprep.subr.bf16.mxu0 %v8566
  %9200 = vmatpush1.bf16.msra.mxu0 %v8565
  %9201 = vmatprep.subr.bf16.mxu0 %v8581
  %9202 = vmatpush1.bf16.msra.mxu0 %v8580
  %9203 = vmatprep.subr.bf16.mxu0 %v8596
  %9204 = vmatpush1.bf16.msra.mxu0 %v8595
  %9205 = vmatprep.subr.bf16.mxu0 %v8611
  %9206 = vmatpush1.bf16.msra.mxu0 %v8610
  %9207 = vmatprep.subr.bf16.mxu0 %v8626
  %9208 = vmatpush1.bf16.msra.mxu0 %v8625
  %9209 = vmatprep.subr.bf16.mxu0 %v8641
  %9210 = vmatpush1.bf16.msra.mxu0 %v8640
  %9211 = vmatprep.subr.bf16.mxu0 %v8656
  %9212 = vmatpush1.bf16.msra.mxu0 %v8655
  %9213 = vmatprep.subr.bf16.mxu0 %v8671
  %9214 = vmatpush1.bf16.msra.mxu0 %v8670
  %9215 = vmatprep.subr.bf16.mxu0 %v8686
  %9216 = vmatpush1.bf16.msra.mxu0 %v8685
  %9217 = vmatprep.subr.bf16.mxu0 0
  %9218 = vmatpush1.bf16.msra.mxu0 0
  %9219 = vmatprep.subr.bf16.mxu0 0
  %9220 = vmatpush1.bf16.msra.mxu0 0
  %9221 = vmatprep.subr.bf16.mxu0 0
  %9222 = vmatpush1.bf16.msra.mxu0 0
  %9223 = vmatprep.subr.bf16.mxu0 0
  %9224 = vmatpush1.bf16.msra.mxu0 0
  %9225 = vmatprep.subr.bf16.mxu0 0
  %9226 = vmatpush1.bf16.msra.mxu0 0
  %9227 = vmatprep.subr.bf16.mxu0 0
  %9228 = vmatpush1.bf16.msra.mxu0 0
  %9229 = vmatprep.subr.bf16.mxu0 0
  %9230 = vmatpush1.bf16.msra.mxu0 0
  %9231 = vmatprep.mubr.bf16.mxu0 %v9074
  %9232 = vmatmul.mubr.bf16.gmra.mrb[0].mxu0 %v6692
  %v9233 = vpop.f32.mrb[0].mxu0
  %v9234 = vadd.f32 %v9193, %v9233
  %v9235 = vpop.f32.mrb[0].mxu0
  %v9236 = vadd.f32 %v9195, %v9235
  %v9237 = vpop.f32.mrb[0].mxu0
  %v9238 = vpop.f32.mrb[0].mxu0
  %9239 = vdwg.mxu0
  %9240 = vmatprep.subr.bf16.mxu0 %v8328
  %9241 = vmatpush1.bf16.msra.mxu0 %v8327
  %9242 = vmatprep.subr.bf16.mxu0 %v8343
  %9243 = vmatpush1.bf16.msra.mxu0 %v8342
  %9244 = vmatprep.subr.bf16.mxu0 %v8358
  %9245 = vmatpush1.bf16.msra.mxu0 %v8357
  %9246 = vmatprep.subr.bf16.mxu0 %v8373
  %9247 = vmatpush1.bf16.msra.mxu0 %v8372
  %9248 = vmatprep.subr.bf16.mxu0 %v8388
  %9249 = vmatpush1.bf16.msra.mxu0 %v8387
  %9250 = vmatprep.subr.bf16.mxu0 %v8403
  %9251 = vmatpush1.bf16.msra.mxu0 %v8402
  %9252 = vmatprep.subr.bf16.mxu0 %v8418
  %9253 = vmatpush1.bf16.msra.mxu0 %v8417
  %9254 = vmatprep.subr.bf16.mxu0 %v8433
  %9255 = vmatpush1.bf16.msra.mxu0 %v8432
  %9256 = vmatprep.subr.bf16.mxu0 %v8448
  %9257 = vmatpush1.bf16.msra.mxu0 %v8447
  %9258 = vmatprep.subr.bf16.mxu0 %v8463
  %9259 = vmatpush1.bf16.msra.mxu0 %v8462
  %9260 = vmatprep.subr.bf16.mxu0 %v8478
  %9261 = vmatpush1.bf16.msra.mxu0 %v8477
  %9262 = vmatprep.subr.bf16.mxu0 %v8493
  %9263 = vmatpush1.bf16.msra.mxu0 %v8492
  %9264 = vmatprep.subr.bf16.mxu0 %v8508
  %9265 = vmatpush1.bf16.msra.mxu0 %v8507
  %9266 = vmatprep.subr.bf16.mxu0 %v8523
  %9267 = vmatpush1.bf16.msra.mxu0 %v8522
  %9268 = vmatprep.subr.bf16.mxu0 %v8538
  %9269 = vmatpush1.bf16.msra.mxu0 %v8537
  %9270 = vmatprep.subr.bf16.mxu0 %v8553
  %9271 = vmatpush1.bf16.msra.mxu0 %v8552
  %9272 = vmatprep.mubr.bf16.mxu0 %v6691
  %9273 = vmatmul.mubr.bf16.gmra.mrb[0].mxu0 %v6690
  %v9274 = vpop.f32.mrb[0].mxu0
  %v9275 = vadd.f32 %v7117, %v9274
  %v9276 = vpop.f32.mrb[0].mxu0
  %v9277 = vadd.f32 %v7121, %v9276
  %v9278 = vpop.f32.mrb[0].mxu0
  %v9279 = vpop.f32.mrb[0].mxu0
  %9280 = vdwg.mxu0
  %9281 = vmatprep.subr.bf16.mxu0 %v8568
  %9282 = vmatpush1.bf16.msra.mxu0 %v8567
  %9283 = vmatprep.subr.bf16.mxu0 %v8583
  %9284 = vmatpush1.bf16.msra.mxu0 %v8582
  %9285 = vmatprep.subr.bf16.mxu0 %v8598
  %9286 = vmatpush1.bf16.msra.mxu0 %v8597
  %9287 = vmatprep.subr.bf16.mxu0 %v8613
  %9288 = vmatpush1.bf16.msra.mxu0 %v8612
  %9289 = vmatprep.subr.bf16.mxu0 %v8628
  %9290 = vmatpush1.bf16.msra.mxu0 %v8627
  %9291 = vmatprep.subr.bf16.mxu0 %v8643
  %9292 = vmatpush1.bf16.msra.mxu0 %v8642
  %9293 = vmatprep.subr.bf16.mxu0 %v8658
  %9294 = vmatpush1.bf16.msra.mxu0 %v8657
  %9295 = vmatprep.subr.bf16.mxu0 %v8673
  %9296 = vmatpush1.bf16.msra.mxu0 %v8672
  %9297 = vmatprep.subr.bf16.mxu0 %v8688
  %9298 = vmatpush1.bf16.msra.mxu0 %v8687
  %9299 = vmatprep.subr.bf16.mxu0 0
  %9300 = vmatpush1.bf16.msra.mxu0 0
  %9301 = vmatprep.subr.bf16.mxu0 0
  %9302 = vmatpush1.bf16.msra.mxu0 0
  %9303 = vmatprep.subr.bf16.mxu0 0
  %9304 = vmatpush1.bf16.msra.mxu0 0
  %9305 = vmatprep.subr.bf16.mxu0 0
  %9306 = vmatpush1.bf16.msra.mxu0 0
  %9307 = vmatprep.subr.bf16.mxu0 0
  %9308 = vmatpush1.bf16.msra.mxu0 0
  %9309 = vmatprep.subr.bf16.mxu0 0
  %9310 = vmatpush1.bf16.msra.mxu0 0
  %9311 = vmatprep.subr.bf16.mxu0 0
  %9312 = vmatpush1.bf16.msra.mxu0 0
  %9313 = vmatprep.mubr.bf16.mxu0 %v9074
  %9314 = vmatmul.mubr.bf16.gmra.mrb[0].mxu0 %v6692
  %v9315 = vpop.f32.mrb[0].mxu0
  %v9316 = vadd.f32 %v9275, %v9315
  %v9317 = vpop.f32.mrb[0].mxu0
  %v9318 = vadd.f32 %v9277, %v9317
  %v9319 = vpop.f32.mrb[0].mxu0
  %v9320 = vpop.f32.mrb[0].mxu0
  %9321 = vdwg.mxu0
  %9322 = vmatprep.subr.bf16.mxu0 %v8330
  %9323 = vmatpush1.bf16.msra.mxu0 %v8329
  %9324 = vmatprep.subr.bf16.mxu0 %v8345
  %9325 = vmatpush1.bf16.msra.mxu0 %v8344
  %9326 = vmatprep.subr.bf16.mxu0 %v8360
  %9327 = vmatpush1.bf16.msra.mxu0 %v8359
  %9328 = vmatprep.subr.bf16.mxu0 %v8375
  %9329 = vmatpush1.bf16.msra.mxu0 %v8374
  %9330 = vmatprep.subr.bf16.mxu0 %v8390
  %9331 = vmatpush1.bf16.msra.mxu0 %v8389
  %9332 = vmatprep.subr.bf16.mxu0 %v8405
  %9333 = vmatpush1.bf16.msra.mxu0 %v8404
  %9334 = vmatprep.subr.bf16.mxu0 %v8420
  %9335 = vmatpush1.bf16.msra.mxu0 %v8419
  %9336 = vmatprep.subr.bf16.mxu0 %v8435
  %9337 = vmatpush1.bf16.msra.mxu0 %v8434
  %9338 = vmatprep.subr.bf16.mxu0 %v8450
  %9339 = vmatpush1.bf16.msra.mxu0 %v8449
  %9340 = vmatprep.subr.bf16.mxu0 %v8465
  %9341 = vmatpush1.bf16.msra.mxu0 %v8464
  %9342 = vmatprep.subr.bf16.mxu0 %v8480
  %9343 = vmatpush1.bf16.msra.mxu0 %v8479
  %9344 = vmatprep.subr.bf16.mxu0 %v8495
  %9345 = vmatpush1.bf16.msra.mxu0 %v8494
  %9346 = vmatprep.subr.bf16.mxu0 %v8510
  %9347 = vmatpush1.bf16.msra.mxu0 %v8509
  %9348 = vmatprep.subr.bf16.mxu0 %v8525
  %9349 = vmatpush1.bf16.msra.mxu0 %v8524
  %9350 = vmatprep.subr.bf16.mxu0 %v8540
  %9351 = vmatpush1.bf16.msra.mxu0 %v8539
  %9352 = vmatprep.subr.bf16.mxu0 %v8555
  %9353 = vmatpush1.bf16.msra.mxu0 %v8554
  %9354 = vmatprep.mubr.bf16.mxu0 %v6691
  %9355 = vmatmul.mubr.bf16.gmra.mrb[0].mxu0 %v6690
  %v9356 = vpop.f32.mrb[0].mxu0
  %v9357 = vadd.f32 %v7125, %v9356
  %v9358 = vpop.f32.mrb[0].mxu0
  %v9359 = vadd.f32 %v7129, %v9358
  %v9360 = vpop.f32.mrb[0].mxu0
  %v9361 = vpop.f32.mrb[0].mxu0
  %9362 = vdwg.mxu0
  %9363 = vmatprep.subr.bf16.mxu0 %v8570
  %9364 = vmatpush1.bf16.msra.mxu0 %v8569
  %9365 = vmatprep.subr.bf16.mxu0 %v8585
  %9366 = vmatpush1.bf16.msra.mxu0 %v8584
  %9367 = vmatprep.subr.bf16.mxu0 %v8600
  %9368 = vmatpush1.bf16.msra.mxu0 %v8599
  %9369 = vmatprep.subr.bf16.mxu0 %v8615
  %9370 = vmatpush1.bf16.msra.mxu0 %v8614
  %9371 = vmatprep.subr.bf16.mxu0 %v8630
  %9372 = vmatpush1.bf16.msra.mxu0 %v8629
  %9373 = vmatprep.subr.bf16.mxu0 %v8645
  %9374 = vmatpush1.bf16.msra.mxu0 %v8644
  %9375 = vmatprep.subr.bf16.mxu0 %v8660
  %9376 = vmatpush1.bf16.msra.mxu0 %v8659
  %9377 = vmatprep.subr.bf16.mxu0 %v8675
  %9378 = vmatpush1.bf16.msra.mxu0 %v8674
  %9379 = vmatprep.subr.bf16.mxu0 %v8690
  %9380 = vmatpush1.bf16.msra.mxu0 %v8689
  %9381 = vmatprep.subr.bf16.mxu0 0
  %9382 = vmatpush1.bf16.msra.mxu0 0
  %9383 = vmatprep.subr.bf16.mxu0 0
  %9384 = vmatpush1.bf16.msra.mxu0 0
  %9385 = vmatprep.subr.bf16.mxu0 0
  %9386 = vmatpush1.bf16.msra.mxu0 0
  %9387 = vmatprep.subr.bf16.mxu0 0
  %9388 = vmatpush1.bf16.msra.mxu0 0
  %9389 = vmatprep.subr.bf16.mxu0 0
  %9390 = vmatpush1.bf16.msra.mxu0 0
  %9391 = vmatprep.subr.bf16.mxu0 0
  %9392 = vmatpush1.bf16.msra.mxu0 0
  %9393 = vmatprep.subr.bf16.mxu0 0
  %9394 = vmatpush1.bf16.msra.mxu0 0
  %9395 = vmatprep.mubr.bf16.mxu0 %v9074
  %9396 = vmatmul.mubr.bf16.gmra.mrb[0].mxu0 %v6692
  %v9397 = vpop.f32.mrb[0].mxu0
  %v9398 = vadd.f32 %v9357, %v9397
  %v9399 = vpop.f32.mrb[0].mxu0
  %v9400 = vadd.f32 %v9359, %v9399
  %v9401 = vpop.f32.mrb[0].mxu0
  %v9402 = vpop.f32.mrb[0].mxu0
  %9403 = vdwg.mxu0
  %9404 = vmatprep.subr.bf16.mxu0 %v8332
  %9405 = vmatpush1.bf16.msra.mxu0 %v8331
  %9406 = vmatprep.subr.bf16.mxu0 %v8347
  %9407 = vmatpush1.bf16.msra.mxu0 %v8346
  %9408 = vmatprep.subr.bf16.mxu0 %v8362
  %9409 = vmatpush1.bf16.msra.mxu0 %v8361
  %9410 = vmatprep.subr.bf16.mxu0 %v8377
  %9411 = vmatpush1.bf16.msra.mxu0 %v8376
  %9412 = vmatprep.subr.bf16.mxu0 %v8392
  %9413 = vmatpush1.bf16.msra.mxu0 %v8391
  %9414 = vmatprep.subr.bf16.mxu0 %v8407
  %9415 = vmatpush1.bf16.msra.mxu0 %v8406
  %9416 = vmatprep.subr.bf16.mxu0 %v8422
  %9417 = vmatpush1.bf16.msra.mxu0 %v8421
  %9418 = vmatprep.subr.bf16.mxu0 %v8437
  %9419 = vmatpush1.bf16.msra.mxu0 %v8436
  %9420 = vmatprep.subr.bf16.mxu0 %v8452
  %9421 = vmatpush1.bf16.msra.mxu0 %v8451
  %9422 = vmatprep.subr.bf16.mxu0 %v8467
  %9423 = vmatpush1.bf16.msra.mxu0 %v8466
  %9424 = vmatprep.subr.bf16.mxu0 %v8482
  %9425 = vmatpush1.bf16.msra.mxu0 %v8481
  %9426 = vmatprep.subr.bf16.mxu0 %v8497
  %9427 = vmatpush1.bf16.msra.mxu0 %v8496
  %9428 = vmatprep.subr.bf16.mxu0 %v8512
  %9429 = vmatpush1.bf16.msra.mxu0 %v8511
  %9430 = vmatprep.subr.bf16.mxu0 %v8527
  %9431 = vmatpush1.bf16.msra.mxu0 %v8526
  %9432 = vmatprep.subr.bf16.mxu0 %v8542
  %9433 = vmatpush1.bf16.msra.mxu0 %v8541
  %9434 = vmatprep.subr.bf16.mxu0 %v8557
  %9435 = vmatpush1.bf16.msra.mxu0 %v8556
  %9436 = vmatprep.mubr.bf16.mxu0 %v6691
  %9437 = vmatmul.mubr.bf16.gmra.mrb[0].mxu0 %v6690
  %v9438 = vpop.f32.mrb[0].mxu0
  %v9439 = vadd.f32 %v7133, %v9438
  %v9440 = vpop.f32.mrb[0].mxu0
  %v9441 = vadd.f32 %v7137, %v9440
  %v9442 = vpop.f32.mrb[0].mxu0
  %v9443 = vpop.f32.mrb[0].mxu0
  %9444 = vdwg.mxu0
  %9445 = vmatprep.subr.bf16.mxu0 %v8572
  %9446 = vmatpush1.bf16.msra.mxu0 %v8571
  %9447 = vmatprep.subr.bf16.mxu0 %v8587
  %9448 = vmatpush1.bf16.msra.mxu0 %v8586
  %9449 = vmatprep.subr.bf16.mxu0 %v8602
  %9450 = vmatpush1.bf16.msra.mxu0 %v8601
  %9451 = vmatprep.subr.bf16.mxu0 %v8617
  %9452 = vmatpush1.bf16.msra.mxu0 %v8616
  %9453 = vmatprep.subr.bf16.mxu0 %v8632
  %9454 = vmatpush1.bf16.msra.mxu0 %v8631
  %9455 = vmatprep.subr.bf16.mxu0 %v8647
  %9456 = vmatpush1.bf16.msra.mxu0 %v8646
  %9457 = vmatprep.subr.bf16.mxu0 %v8662
  %9458 = vmatpush1.bf16.msra.mxu0 %v8661
  %9459 = vmatprep.subr.bf16.mxu0 %v8677
  %9460 = vmatpush1.bf16.msra.mxu0 %v8676
  %9461 = vmatprep.subr.bf16.mxu0 %v8692
  %9462 = vmatpush1.bf16.msra.mxu0 %v8691
  %9463 = vmatprep.subr.bf16.mxu0 0
  %9464 = vmatpush1.bf16.msra.mxu0 0
  %9465 = vmatprep.subr.bf16.mxu0 0
  %9466 = vmatpush1.bf16.msra.mxu0 0
  %9467 = vmatprep.subr.bf16.mxu0 0
  %9468 = vmatpush1.bf16.msra.mxu0 0
  %9469 = vmatprep.subr.bf16.mxu0 0
  %9470 = vmatpush1.bf16.msra.mxu0 0
  %9471 = vmatprep.subr.bf16.mxu0 0
  %9472 = vmatpush1.bf16.msra.mxu0 0
  %9473 = vmatprep.subr.bf16.mxu0 0
  %9474 = vmatpush1.bf16.msra.mxu0 0
  %9475 = vmatprep.subr.bf16.mxu0 0
  %9476 = vmatpush1.bf16.msra.mxu0 0
  %9477 = vmatprep.mubr.bf16.mxu0 %v9074
  %9478 = vmatmul.mubr.bf16.gmra.mrb[0].mxu0 %v6692
  %v9479 = vpop.f32.mrb[0].mxu0
  %v9480 = vadd.f32 %v9439, %v9479
  %v9481 = vpop.f32.mrb[0].mxu0
  %v9482 = vadd.f32 %v9441, %v9481
  %v9483 = vpop.f32.mrb[0].mxu0
  %v9484 = vpop.f32.mrb[0].mxu0
  %9485 = vdwg.mxu0
  %9486 = vmatprep.subr.bf16.mxu0 %v8334
  %9487 = vmatpush1.bf16.msra.mxu0 %v8333
  %9488 = vmatprep.subr.bf16.mxu0 %v8349
  %9489 = vmatpush1.bf16.msra.mxu0 %v8348
  %9490 = vmatprep.subr.bf16.mxu0 %v8364
  %9491 = vmatpush1.bf16.msra.mxu0 %v8363
  %9492 = vmatprep.subr.bf16.mxu0 %v8379
  %9493 = vmatpush1.bf16.msra.mxu0 %v8378
  %9494 = vmatprep.subr.bf16.mxu0 %v8394
  %9495 = vmatpush1.bf16.msra.mxu0 %v8393
  %9496 = vmatprep.subr.bf16.mxu0 %v8409
  %9497 = vmatpush1.bf16.msra.mxu0 %v8408
  %9498 = vmatprep.subr.bf16.mxu0 %v8424
  %9499 = vmatpush1.bf16.msra.mxu0 %v8423
  %9500 = vmatprep.subr.bf16.mxu0 %v8439
  %9501 = vmatpush1.bf16.msra.mxu0 %v8438
  %9502 = vmatprep.subr.bf16.mxu0 %v8454
  %9503 = vmatpush1.bf16.msra.mxu0 %v8453
  %9504 = vmatprep.subr.bf16.mxu0 %v8469
  %9505 = vmatpush1.bf16.msra.mxu0 %v8468
  %9506 = vmatprep.subr.bf16.mxu0 %v8484
  %9507 = vmatpush1.bf16.msra.mxu0 %v8483
  %9508 = vmatprep.subr.bf16.mxu0 %v8499
  %9509 = vmatpush1.bf16.msra.mxu0 %v8498
  %9510 = vmatprep.subr.bf16.mxu0 %v8514
  %9511 = vmatpush1.bf16.msra.mxu0 %v8513
  %9512 = vmatprep.subr.bf16.mxu0 %v8529
  %9513 = vmatpush1.bf16.msra.mxu0 %v8528
  %9514 = vmatprep.subr.bf16.mxu0 %v8544
  %9515 = vmatpush1.bf16.msra.mxu0 %v8543
  %9516 = vmatprep.subr.bf16.mxu0 %v8559
  %9517 = vmatpush1.bf16.msra.mxu0 %v8558
  %9518 = vmatprep.mubr.bf16.mxu0 %v6691
  %9519 = vmatmul.mubr.bf16.gmra.mrb[0].mxu0 %v6690
  %v9520 = vpop.f32.mrb[0].mxu0
  %v9521 = vadd.f32 %v7141, %v9520
  %v9522 = vpop.f32.mrb[0].mxu0
  %v9523 = vadd.f32 %v7145, %v9522
  %v9524 = vpop.f32.mrb[0].mxu0
  %v9525 = vpop.f32.mrb[0].mxu0
  %9526 = vdwg.mxu0
  %9527 = vmatprep.subr.bf16.mxu0 %v8574
  %9528 = vmatpush1.bf16.msra.mxu0 %v8573
  %9529 = vmatprep.subr.bf16.mxu0 %v8589
  %9530 = vmatpush1.bf16.msra.mxu0 %v8588
  %9531 = vmatprep.subr.bf16.mxu0 %v8604
  %9532 = vmatpush1.bf16.msra.mxu0 %v8603
  %9533 = vmatprep.subr.bf16.mxu0 %v8619
  %9534 = vmatpush1.bf16.msra.mxu0 %v8618
  %9535 = vmatprep.subr.bf16.mxu0 %v8634
  %9536 = vmatpush1.bf16.msra.mxu0 %v8633
  %9537 = vmatprep.subr.bf16.mxu0 %v8649
  %9538 = vmatpush1.bf16.msra.mxu0 %v8648
  %9539 = vmatprep.subr.bf16.mxu0 %v8664
  %9540 = vmatpush1.bf16.msra.mxu0 %v8663
  %9541 = vmatprep.subr.bf16.mxu0 %v8679
  %9542 = vmatpush1.bf16.msra.mxu0 %v8678
  %9543 = vmatprep.subr.bf16.mxu0 %v8694
  %9544 = vmatpush1.bf16.msra.mxu0 %v8693
  %9545 = vmatprep.subr.bf16.mxu0 0
  %9546 = vmatpush1.bf16.msra.mxu0 0
  %9547 = vmatprep.subr.bf16.mxu0 0
  %9548 = vmatpush1.bf16.msra.mxu0 0
  %9549 = vmatprep.subr.bf16.mxu0 0
  %9550 = vmatpush1.bf16.msra.mxu0 0
  %9551 = vmatprep.subr.bf16.mxu0 0
  %9552 = vmatpush1.bf16.msra.mxu0 0
  %9553 = vmatprep.subr.bf16.mxu0 0
  %9554 = vmatpush1.bf16.msra.mxu0 0
  %9555 = vmatprep.subr.bf16.mxu0 0
  %9556 = vmatpush1.bf16.msra.mxu0 0
  %9557 = vmatprep.subr.bf16.mxu0 0
  %9558 = vmatpush1.bf16.msra.mxu0 0
  %9559 = vmatprep.mubr.bf16.mxu0 %v9074
  %9560 = vmatmul.mubr.bf16.gmra.mrb[0].mxu0 %v6692
  %v9561 = vpop.f32.mrb[0].mxu0
  %v9562 = vadd.f32 %v9521, %v9561
  %v9563 = vpop.f32.mrb[0].mxu0
  %v9564 = vadd.f32 %v9523, %v9563
  %v9565 = vpop.f32.mrb[0].mxu0
  %v9566 = vpop.f32.mrb[0].mxu0
  %9567 = vdwg.mxu0
  %9568 = vmatprep.subr.bf16.mxu0 %v8336
  %9569 = vmatpush1.bf16.msra.mxu0 %v8335
  %9570 = vmatprep.subr.bf16.mxu0 %v8351
  %9571 = vmatpush1.bf16.msra.mxu0 %v8350
  %9572 = vmatprep.subr.bf16.mxu0 %v8366
  %9573 = vmatpush1.bf16.msra.mxu0 %v8365
  %9574 = vmatprep.subr.bf16.mxu0 %v8381
  %9575 = vmatpush1.bf16.msra.mxu0 %v8380
  %9576 = vmatprep.subr.bf16.mxu0 %v8396
  %9577 = vmatpush1.bf16.msra.mxu0 %v8395
  %9578 = vmatprep.subr.bf16.mxu0 %v8411
  %9579 = vmatpush1.bf16.msra.mxu0 %v8410
  %9580 = vmatprep.subr.bf16.mxu0 %v8426
  %9581 = vmatpush1.bf16.msra.mxu0 %v8425
  %9582 = vmatprep.subr.bf16.mxu0 %v8441
  %9583 = vmatpush1.bf16.msra.mxu0 %v8440
  %9584 = vmatprep.subr.bf16.mxu0 %v8456
  %9585 = vmatpush1.bf16.msra.mxu0 %v8455
  %9586 = vmatprep.subr.bf16.mxu0 %v8471
  %9587 = vmatpush1.bf16.msra.mxu0 %v8470
  %9588 = vmatprep.subr.bf16.mxu0 %v8486
  %9589 = vmatpush1.bf16.msra.mxu0 %v8485
  %9590 = vmatprep.subr.bf16.mxu0 %v8501
  %9591 = vmatpush1.bf16.msra.mxu0 %v8500
  %9592 = vmatprep.subr.bf16.mxu0 %v8516
  %9593 = vmatpush1.bf16.msra.mxu0 %v8515
  %9594 = vmatprep.subr.bf16.mxu0 %v8531
  %9595 = vmatpush1.bf16.msra.mxu0 %v8530
  %9596 = vmatprep.subr.bf16.mxu0 %v8546
  %9597 = vmatpush1.bf16.msra.mxu0 %v8545
  %9598 = vmatprep.subr.bf16.mxu0 %v8561
  %9599 = vmatpush1.bf16.msra.mxu0 %v8560
  %9600 = vmatprep.mubr.bf16.mxu0 %v6691
  %9601 = vmatmul.mubr.bf16.gmra.mrb[0].mxu0 %v6690
  %v9602 = vpop.f32.mrb[0].mxu0
  %v9603 = vadd.f32 %v7149, %v9602
  %v9604 = vpop.f32.mrb[0].mxu0
  %v9605 = vadd.f32 %v7153, %v9604
  %v9606 = vpop.f32.mrb[0].mxu0
  %v9607 = vpop.f32.mrb[0].mxu0
  %9608 = vdwg.mxu0
  %9609 = vmatprep.subr.bf16.mxu0 %v8576
  %9610 = vmatpush1.bf16.msra.mxu0 %v8575
  %9611 = vmatprep.subr.bf16.mxu0 %v8591
  %9612 = vmatpush1.bf16.msra.mxu0 %v8590
  %9613 = vmatprep.subr.bf16.mxu0 %v8606
  %9614 = vmatpush1.bf16.msra.mxu0 %v8605
  %9615 = vmatprep.subr.bf16.mxu0 %v8621
  %9616 = vmatpush1.bf16.msra.mxu0 %v8620
  %9617 = vmatprep.subr.bf16.mxu0 %v8636
  %9618 = vmatpush1.bf16.msra.mxu0 %v8635
  %9619 = vmatprep.subr.bf16.mxu0 %v8651
  %9620 = vmatpush1.bf16.msra.mxu0 %v8650
  %9621 = vmatprep.subr.bf16.mxu0 %v8666
  %9622 = vmatpush1.bf16.msra.mxu0 %v8665
  %9623 = vmatprep.subr.bf16.mxu0 %v8681
  %9624 = vmatpush1.bf16.msra.mxu0 %v8680
  %9625 = vmatprep.subr.bf16.mxu0 %v8696
  %9626 = vmatpush1.bf16.msra.mxu0 %v8695
  %9627 = vmatprep.subr.bf16.mxu0 0
  %9628 = vmatpush1.bf16.msra.mxu0 0
  %9629 = vmatprep.subr.bf16.mxu0 0
  %9630 = vmatpush1.bf16.msra.mxu0 0
  %9631 = vmatprep.subr.bf16.mxu0 0
  %9632 = vmatpush1.bf16.msra.mxu0 0
  %9633 = vmatprep.subr.bf16.mxu0 0
  %9634 = vmatpush1.bf16.msra.mxu0 0
  %9635 = vmatprep.subr.bf16.mxu0 0
  %9636 = vmatpush1.bf16.msra.mxu0 0
  %9637 = vmatprep.subr.bf16.mxu0 0
  %9638 = vmatpush1.bf16.msra.mxu0 0
  %9639 = vmatprep.subr.bf16.mxu0 0
  %9640 = vmatpush1.bf16.msra.mxu0 0
  %9641 = vmatprep.mubr.bf16.mxu0 %v9074
  %9642 = vmatmul.mubr.bf16.gmra.mrb[0].mxu0 %v6692
  %v9643 = vpop.f32.mrb[0].mxu0
  %v9644 = vadd.f32 %v9603, %v9643
  %v9645 = vpop.f32.mrb[0].mxu0
  %v9646 = vadd.f32 %v9605, %v9645
  %v9647 = vpop.f32.mrb[0].mxu0
  %v9648 = vpop.f32.mrb[0].mxu0
  %9649 = vdwg.mxu0
  %9650 = vmatprep.subr.bf16.mxu0 0
  %9651 = vmatpush1.bf16.msra.mxu0 %v8337
  %9652 = vmatprep.subr.bf16.mxu0 0
  %9653 = vmatpush1.bf16.msra.mxu0 %v8352
  %9654 = vmatprep.subr.bf16.mxu0 0
  %9655 = vmatpush1.bf16.msra.mxu0 %v8367
  %9656 = vmatprep.subr.bf16.mxu0 0
  %9657 = vmatpush1.bf16.msra.mxu0 %v8382
  %9658 = vmatprep.subr.bf16.mxu0 0
  %9659 = vmatpush1.bf16.msra.mxu0 %v8397
  %9660 = vmatprep.subr.bf16.mxu0 0
  %9661 = vmatpush1.bf16.msra.mxu0 %v8412
  %9662 = vmatprep.subr.bf16.mxu0 0
  %9663 = vmatpush1.bf16.msra.mxu0 %v8427
  %9664 = vmatprep.subr.bf16.mxu0 0
  %9665 = vmatpush1.bf16.msra.mxu0 %v8442
  %9666 = vmatprep.subr.bf16.mxu0 0
  %9667 = vmatpush1.bf16.msra.mxu0 %v8457
  %9668 = vmatprep.subr.bf16.mxu0 0
  %9669 = vmatpush1.bf16.msra.mxu0 %v8472
  %9670 = vmatprep.subr.bf16.mxu0 0
  %9671 = vmatpush1.bf16.msra.mxu0 %v8487
  %9672 = vmatprep.subr.bf16.mxu0 0
  %9673 = vmatpush1.bf16.msra.mxu0 %v8502
  %9674 = vmatprep.subr.bf16.mxu0 0
  %9675 = vmatpush1.bf16.msra.mxu0 %v8517
  %9676 = vmatprep.subr.bf16.mxu0 0
  %9677 = vmatpush1.bf16.msra.mxu0 %v8532
  %9678 = vmatprep.subr.bf16.mxu0 0
  %9679 = vmatpush1.bf16.msra.mxu0 %v8547
  %9680 = vmatprep.subr.bf16.mxu0 0
  %9681 = vmatpush1.bf16.msra.mxu0 %v8562
  %9682 = vmatprep.mubr.bf16.mxu0 %v6691
  %9683 = vmatmul.mubr.bf16.gmra.mrb[0].mxu0 %v6690
  %v9684 = vpop.f32.mrb[0].mxu0
  %v9685 = vadd.f32 %v7157, %v9684
  %v9686 = vpop.f32.mrb[0].mxu0
  %v9687 = vpop.f32.mrb[0].mxu0
  %v9688 = vpop.f32.mrb[0].mxu0
  %9689 = vdwg.mxu0
  %9690 = vmatprep.subr.bf16.mxu0 0
  %9691 = vmatpush1.bf16.msra.mxu0 %v8577
  %9692 = vmatprep.subr.bf16.mxu0 0
  %9693 = vmatpush1.bf16.msra.mxu0 %v8592
  %9694 = vmatprep.subr.bf16.mxu0 0
  %9695 = vmatpush1.bf16.msra.mxu0 %v8607
  %9696 = vmatprep.subr.bf16.mxu0 0
  %9697 = vmatpush1.bf16.msra.mxu0 %v8622
  %9698 = vmatprep.subr.bf16.mxu0 0
  %9699 = vmatpush1.bf16.msra.mxu0 %v8637
  %9700 = vmatprep.subr.bf16.mxu0 0
  %9701 = vmatpush1.bf16.msra.mxu0 %v8652
  %9702 = vmatprep.subr.bf16.mxu0 0
  %9703 = vmatpush1.bf16.msra.mxu0 %v8667
  %9704 = vmatprep.subr.bf16.mxu0 0
  %9705 = vmatpush1.bf16.msra.mxu0 %v8682
  %9706 = vmatprep.subr.bf16.mxu0 0
  %9707 = vmatpush1.bf16.msra.mxu0 %v8697
  %9708 = vmatprep.subr.bf16.mxu0 0
  %9709 = vmatpush1.bf16.msra.mxu0 0
  %9710 = vmatprep.subr.bf16.mxu0 0
  %9711 = vmatpush1.bf16.msra.mxu0 0
  %9712 = vmatprep.subr.bf16.mxu0 0
  %9713 = vmatpush1.bf16.msra.mxu0 0
  %9714 = vmatprep.subr.bf16.mxu0 0
  %9715 = vmatpush1.bf16.msra.mxu0 0
  %9716 = vmatprep.subr.bf16.mxu0 0
  %9717 = vmatpush1.bf16.msra.mxu0 0
  %9718 = vmatprep.subr.bf16.mxu0 0
  %9719 = vmatpush1.bf16.msra.mxu0 0
  %9720 = vmatprep.subr.bf16.mxu0 0
  %9721 = vmatpush1.bf16.msra.mxu0 0
  %9722 = vmatprep.mubr.bf16.mxu0 %v9074
  %9723 = vmatmul.mubr.bf16.gmra.mrb[0].mxu0 %v6692
  %v9724 = vpop.f32.mrb[0].mxu0
  %v9725 = vadd.f32 %v9685, %v9724
  %v9726 = vpop.f32.mrb[0].mxu0
  %v9727 = vpop.f32.mrb[0].mxu0
  %v9728 = vpop.f32.mrb[0].mxu0
  %9729 = vdwg.mxu0
  %v9730 = vmax.f32 %v9152, 0.0
  %v9731 = vmax.f32 %v9154, 0.0
  %v9732 = vmax.f32 %v9234, 0.0
  %v9733 = vmax.f32 %v9236, 0.0
  %v9734 = vmax.f32 %v9316, 0.0
  %v9735 = vmax.f32 %v9318, 0.0
  %v9736 = vmax.f32 %v9398, 0.0
  %v9737 = vmax.f32 %v9400, 0.0
  %v9738 = vmax.f32 %v9480, 0.0
  %v9739 = vmax.f32 %v9482, 0.0
  %v9740 = vmax.f32 %v9562, 0.0
  %v9741 = vmax.f32 %v9564, 0.0
  %v9742 = vmax.f32 %v9644, 0.0
  %v9743 = vmax.f32 %v9646, 0.0
  %v9744 = vmax.f32 %v9725, 0.0
  %v9745 = vpack.c.bf16 %v9730, %v9730
  %v9746 = vpack.c.bf16 %v9731, %v9731
  %v9747 = vpack.c.bf16 %v9732, %v9732
  %v9748 = vpack.c.bf16 %v9733, %v9733
  %v9749 = vpack.c.bf16 %v9734, %v9734
  %v9750 = vpack.c.bf16 %v9735, %v9735
  %v9751 = vpack.c.bf16 %v9736, %v9736
  %v9752 = vpack.c.bf16 %v9737, %v9737
  %v9753 = vpack.c.bf16 %v9738, %v9738
  %v9754 = vpack.c.bf16 %v9739, %v9739
  %v9755 = vpack.c.bf16 %v9740, %v9740
  %v9756 = vpack.c.bf16 %v9741, %v9741
  %v9757 = vpack.c.bf16 %v9742, %v9742
  %v9758 = vpack.c.bf16 %v9743, %v9743
  %v9759 = vpack.c.bf16 %v9744, %v9744
  %v9760 = vld [vmem:[%s14] sm:$0xff]
  %v9761 = vld [vmem:[%s14 + $0x8] sm:$0xff]
  %v9762 = vld [vmem:[%s14 + $0x10] sm:$0xff]
  %v9763 = vld [vmem:[%s14 + $0x18] sm:$0xf]
  %v9764 = vld [vmem:[%s14 + $0x1c] sm:$0xff]
  %v9765 = vld [vmem:[%s14 + $0x24] sm:$0xff]
  %v9766 = vld [vmem:[%s14 + $0x2c] sm:$0xff]
  %v9767 = vld [vmem:[%s14 + $0x34] sm:$0xf]
  %v9768 = vld [vmem:[%s14 + $0x38] sm:$0xff]
  %v9769 = vld [vmem:[%s14 + $0x40] sm:$0xff]
  %v9770 = vld [vmem:[%s14 + $0x48] sm:$0xff]
  %v9771 = vld [vmem:[%s14 + $0x50] sm:$0xf]
  %v9772 = vld [vmem:[%s14 + $0x54] sm:$0xff]
  %v9773 = vld [vmem:[%s14 + $0x5c] sm:$0xff]
  %v9774 = vld [vmem:[%s14 + $0x64] sm:$0xff]
  %v9775 = vld [vmem:[%s14 + $0x6c] sm:$0xf]
  %v9776 = vld [vmem:[%s14 + $0x70] sm:$0xff]
  %v9777 = vld [vmem:[%s14 + $0x78] sm:$0xff]
  %v9778 = vld [vmem:[%s14 + $0x80] sm:$0xff]
  %v9779 = vld [vmem:[%s14 + $0x88] sm:$0xf]
  %v9780 = vld [vmem:[%s14 + $0x8c] sm:$0xff]
  %v9781 = vld [vmem:[%s14 + $0x94] sm:$0xff]
  %v9782 = vld [vmem:[%s14 + $0x9c] sm:$0xff]
  %v9783 = vld [vmem:[%s14 + $0xa4] sm:$0xf]
  %v9784 = vld [vmem:[%s14 + $0xa8] sm:$0xff]
  %v9785 = vld [vmem:[%s14 + $0xb0] sm:$0xff]
  %v9786 = vld [vmem:[%s14 + $0xb8] sm:$0xff]
  %v9787 = vld [vmem:[%s14 + $0xc0] sm:$0xf]
  %v9788 = vld [vmem:[%s14 + $0xc4] sm:$0xff]
  %v9789 = vld [vmem:[%s14 + $0xcc] sm:$0xff]
  %v9790 = vld [vmem:[%s14 + $0xd4] sm:$0xff]
  %v9791 = vld [vmem:[%s14 + $0xdc] sm:$0xf]
  %v9792 = vld [vmem:[%s14 + $0xe0] sm:$0xff]
  %v9793 = vld [vmem:[%s14 + $0xe8] sm:$0xff]
  %v9794 = vld [vmem:[%s14 + $0xf0] sm:$0xff]
  %v9795 = vld [vmem:[%s14 + $0xf8] sm:$0xf]
  %v9796 = vld [vmem:[%s14 + $0xfc] sm:$0xff]
  %v9797 = vld [vmem:[%s14 + $0x104] sm:$0xff]
  %v9798 = vld [vmem:[%s14 + $0x10c] sm:$0xff]
  %v9799 = vld [vmem:[%s14 + $0x114] sm:$0xf]
  %v9800 = vld [vmem:[%s14 + $0x118] sm:$0xff]
  %v9801 = vld [vmem:[%s14 + $0x120] sm:$0xff]
  %v9802 = vld [vmem:[%s14 + $0x128] sm:$0xff]
  %v9803 = vld [vmem:[%s14 + $0x130] sm:$0xf]
  %v9804 = vld [vmem:[%s14 + $0x134] sm:$0xff]
  %v9805 = vld [vmem:[%s14 + $0x13c] sm:$0xff]
  %v9806 = vld [vmem:[%s14 + $0x144] sm:$0xff]
  %v9807 = vld [vmem:[%s14 + $0x14c] sm:$0xf]
  %v9808 = vld [vmem:[%s14 + $0x150] sm:$0xff]
  %v9809 = vld [vmem:[%s14 + $0x158] sm:$0xff]
  %v9810 = vld [vmem:[%s14 + $0x160] sm:$0xff]
  %v9811 = vld [vmem:[%s14 + $0x168] sm:$0xf]
  %v9812 = vld [vmem:[%s14 + $0x16c] sm:$0xff]
  %v9813 = vld [vmem:[%s14 + $0x174] sm:$0xff]
  %v9814 = vld [vmem:[%s14 + $0x17c] sm:$0xff]
  %v9815 = vld [vmem:[%s14 + $0x184] sm:$0xf]
  %v9816 = vld [vmem:[%s14 + $0x188] sm:$0xff]
  %v9817 = vld [vmem:[%s14 + $0x190] sm:$0xff]
  %v9818 = vld [vmem:[%s14 + $0x198] sm:$0xff]
  %v9819 = vld [vmem:[%s14 + $0x1a0] sm:$0xf]
  %v9820 = vld [vmem:[%s14 + $0x1a4] sm:$0xff]
  %v9821 = vld [vmem:[%s14 + $0x1ac] sm:$0xff]
  %v9822 = vld [vmem:[%s14 + $0x1b4] sm:$0xff]
  %v9823 = vld [vmem:[%s14 + $0x1bc] sm:$0xf]
  %v9824 = vld [vmem:[%s14 + $0x1c0] sm:$0xff]
  %v9825 = vld [vmem:[%s14 + $0x1c8] sm:$0xff]
  %v9826 = vld [vmem:[%s14 + $0x1d0] sm:$0xff]
  %v9827 = vld [vmem:[%s14 + $0x1d8] sm:$0xf]
  %v9828 = vld [vmem:[%s14 + $0x1dc] sm:$0xff]
  %v9829 = vld [vmem:[%s14 + $0x1e4] sm:$0xff]
  %v9830 = vld [vmem:[%s14 + $0x1ec] sm:$0xff]
  %v9831 = vld [vmem:[%s14 + $0x1f4] sm:$0xf]
  %v9832 = vld [vmem:[%s14 + $0x1f8] sm:$0xff]
  %v9833 = vld [vmem:[%s14 + $0x200] sm:$0xff]
  %v9834 = vld [vmem:[%s14 + $0x208] sm:$0xff]
  %v9835 = vld [vmem:[%s14 + $0x210] sm:$0xf]
  %v9836 = vld [vmem:[%s14 + $0x214] sm:$0xff]
  %v9837 = vld [vmem:[%s14 + $0x21c] sm:$0xff]
  %v9838 = vld [vmem:[%s14 + $0x224] sm:$0xff]
  %v9839 = vld [vmem:[%s14 + $0x22c] sm:$0xf]
  %v9840 = vld [vmem:[%s14 + $0x230] sm:$0xff]
  %v9841 = vld [vmem:[%s14 + $0x238] sm:$0xff]
  %v9842 = vld [vmem:[%s14 + $0x240] sm:$0xff]
  %v9843 = vld [vmem:[%s14 + $0x248] sm:$0xf]
  %v9844 = vld [vmem:[%s14 + $0x24c] sm:$0xff]
  %v9845 = vld [vmem:[%s14 + $0x254] sm:$0xff]
  %v9846 = vld [vmem:[%s14 + $0x25c] sm:$0xff]
  %v9847 = vld [vmem:[%s14 + $0x264] sm:$0xf]
  %v9848 = vld [vmem:[%s14 + $0x268] sm:$0xff]
  %v9849 = vld [vmem:[%s14 + $0x270] sm:$0xff]
  %v9850 = vld [vmem:[%s14 + $0x278] sm:$0xff]
  %v9851 = vld [vmem:[%s14 + $0x280] sm:$0xf]
  %v9852 = vld [vmem:[%s14 + $0x284] sm:$0xff]
  %v9853 = vld [vmem:[%s14 + $0x28c] sm:$0xff]
  %v9854 = vld [vmem:[%s14 + $0x294] sm:$0xff]
  %v9855 = vld [vmem:[%s14 + $0x29c] sm:$0xf]
  %v9856 = vld [vmem:[%s14 + $0x2a0] sm:$0xff]
  %v9857 = vld [vmem:[%s14 + $0x2a8] sm:$0xff]
  %v9858 = vld [vmem:[%s14 + $0x2b0] sm:$0xff]
  %v9859 = vld [vmem:[%s14 + $0x2b8] sm:$0xf]
  %v9860 = vld [vmem:[%s14 + $0x2bc] sm:$0xff]
  %v9861 = vld [vmem:[%s14 + $0x2c4] sm:$0xff]
  %v9862 = vld [vmem:[%s14 + $0x2cc] sm:$0xff]
  %v9863 = vld [vmem:[%s14 + $0x2d4] sm:$0xf]
  %v9864 = vld [vmem:[%s14 + $0x2d8] sm:$0xff]
  %v9865 = vld [vmem:[%s14 + $0x2e0] sm:$0xff]
  %v9866 = vld [vmem:[%s14 + $0x2e8] sm:$0xff]
  %v9867 = vld [vmem:[%s14 + $0x2f0] sm:$0xf]
  %v9868 = vld [vmem:[%s14 + $0x2f4] sm:$0xff]
  %v9869 = vld [vmem:[%s14 + $0x2fc] sm:$0xff]
  %v9870 = vld [vmem:[%s14 + $0x304] sm:$0xff]
  %v9871 = vld [vmem:[%s14 + $0x30c] sm:$0xf]
  %v9872 = vld [vmem:[%s14 + $0x310] sm:$0xff]
  %v9873 = vld [vmem:[%s14 + $0x318] sm:$0xff]
  %v9874 = vld [vmem:[%s14 + $0x320] sm:$0xff]
  %v9875 = vld [vmem:[%s14 + $0x328] sm:$0xf]
  %v9876 = vld [vmem:[%s14 + $0x32c] sm:$0xff]
  %v9877 = vld [vmem:[%s14 + $0x334] sm:$0xff]
  %v9878 = vld [vmem:[%s14 + $0x33c] sm:$0xff]
  %v9879 = vld [vmem:[%s14 + $0x344] sm:$0xf]
  %v9880 = vld [vmem:[%s14 + $0x348] sm:$0xff]
  %v9881 = vld [vmem:[%s14 + $0x350] sm:$0xff]
  %v9882 = vld [vmem:[%s14 + $0x358] sm:$0xff]
  %v9883 = vld [vmem:[%s14 + $0x360] sm:$0xf]
  %v9884 = vld [vmem:[%s14 + $0x364] sm:$0xff]
  %v9885 = vld [vmem:[%s14 + $0x36c] sm:$0xff]
  %v9886 = vld [vmem:[%s14 + $0x374] sm:$0xff]
  %v9887 = vld [vmem:[%s14 + $0x37c] sm:$0xf]
  %v9888 = vld [vmem:[%s14 + $0x380] sm:$0xff]
  %v9889 = vld [vmem:[%s14 + $0x388] sm:$0xff]
  %v9890 = vld [vmem:[%s14 + $0x390] sm:$0xff]
  %v9891 = vld [vmem:[%s14 + $0x398] sm:$0xf]
  %v9892 = vld [vmem:[%s14 + $0x39c] sm:$0xff]
  %v9893 = vld [vmem:[%s14 + $0x3a4] sm:$0xff]
  %v9894 = vld [vmem:[%s14 + $0x3ac] sm:$0xff]
  %v9895 = vld [vmem:[%s14 + $0x3b4] sm:$0xf]
  %v9896 = vld [vmem:[%s14 + $0x3b8] sm:$0xff]
  %v9897 = vld [vmem:[%s14 + $0x3c0] sm:$0xff]
  %v9898 = vld [vmem:[%s14 + $0x3c8] sm:$0xff]
  %v9899 = vld [vmem:[%s14 + $0x3d0] sm:$0xf]
  %v9900 = vld [vmem:[%s14 + $0x3d4] sm:$0xff]
  %v9901 = vld [vmem:[%s14 + $0x3dc] sm:$0xff]
  %v9902 = vld [vmem:[%s14 + $0x3e4] sm:$0xff]
  %v9903 = vld [vmem:[%s14 + $0x3ec] sm:$0xf]
  %v9904 = vld [vmem:[%s14 + $0x3f0] sm:$0xff]
  %v9905 = vld [vmem:[%s14 + $0x3f8] sm:$0xff]
  %v9906 = vld [vmem:[%s14 + $0x400] sm:$0xff]
  %v9907 = vld [vmem:[%s14 + $0x408] sm:$0xf]
  %v9908 = vld [vmem:[%s14 + $0x40c] sm:$0xff]
  %v9909 = vld [vmem:[%s14 + $0x414] sm:$0xff]
  %v9910 = vld [vmem:[%s14 + $0x41c] sm:$0xff]
  %v9911 = vld [vmem:[%s14 + $0x424] sm:$0xf]
  %v9912 = vld [vmem:[%s14 + $0x428] sm:$0xff]
  %v9913 = vld [vmem:[%s14 + $0x430] sm:$0xff]
  %v9914 = vld [vmem:[%s14 + $0x438] sm:$0xff]
  %v9915 = vld [vmem:[%s14 + $0x440] sm:$0xf]
  %v9916 = vld [vmem:[%s14 + $0x444] sm:$0xff]
  %v9917 = vld [vmem:[%s14 + $0x44c] sm:$0xff]
  %v9918 = vld [vmem:[%s14 + $0x454] sm:$0xff]
  %v9919 = vld [vmem:[%s14 + $0x45c] sm:$0xf]
  %v9920 = vld [vmem:[%s14 + $0x460] sm:$0xff]
  %v9921 = vld [vmem:[%s14 + $0x468] sm:$0xff]
  %v9922 = vld [vmem:[%s14 + $0x470] sm:$0xff]
  %v9923 = vld [vmem:[%s14 + $0x478] sm:$0xf]
  %v9924 = vld [vmem:[%s14 + $0x47c] sm:$0xff]
  %v9925 = vld [vmem:[%s14 + $0x484] sm:$0xff]
  %v9926 = vld [vmem:[%s14 + $0x48c] sm:$0xff]
  %v9927 = vld [vmem:[%s14 + $0x494] sm:$0xf]
  %v9928 = vld [vmem:[%s14 + $0x498] sm:$0xff]
  %v9929 = vld [vmem:[%s14 + $0x4a0] sm:$0xff]
  %v9930 = vld [vmem:[%s14 + $0x4a8] sm:$0xff]
  %v9931 = vld [vmem:[%s14 + $0x4b0] sm:$0xf]
  %v9932 = vld [vmem:[%s14 + $0x4b4] sm:$0xff]
  %v9933 = vld [vmem:[%s14 + $0x4bc] sm:$0xff]
  %v9934 = vld [vmem:[%s14 + $0x4c4] sm:$0xff]
  %v9935 = vld [vmem:[%s14 + $0x4cc] sm:$0xf]
  %v9936 = vld [vmem:[%s14 + $0x4d0] sm:$0xff]
  %v9937 = vld [vmem:[%s14 + $0x4d8] sm:$0xff]
  %v9938 = vld [vmem:[%s14 + $0x4e0] sm:$0xff]
  %v9939 = vld [vmem:[%s14 + $0x4e8] sm:$0xf]
  %v9940 = vld [vmem:[%s14 + $0x4ec] sm:$0xff]
  %v9941 = vld [vmem:[%s14 + $0x4f4] sm:$0xff]
  %v9942 = vld [vmem:[%s14 + $0x4fc] sm:$0xff]
  %v9943 = vld [vmem:[%s14 + $0x504] sm:$0xf]
  %v9944 = vld [vmem:[%s14 + $0x508] sm:$0xff]
  %v9945 = vld [vmem:[%s14 + $0x510] sm:$0xff]
  %v9946 = vld [vmem:[%s14 + $0x518] sm:$0xff]
  %v9947 = vld [vmem:[%s14 + $0x520] sm:$0xf]
  %v9948 = vld [vmem:[%s14 + $0x524] sm:$0xff]
  %v9949 = vld [vmem:[%s14 + $0x52c] sm:$0xff]
  %v9950 = vld [vmem:[%s14 + $0x534] sm:$0xff]
  %v9951 = vld [vmem:[%s14 + $0x53c] sm:$0xf]
  %v9952 = vld [vmem:[%s14 + $0x540] sm:$0xff]
  %v9953 = vld [vmem:[%s14 + $0x548] sm:$0xff]
  %v9954 = vld [vmem:[%s14 + $0x550] sm:$0xff]
  %v9955 = vld [vmem:[%s14 + $0x558] sm:$0xf]
  %v9956 = vld [vmem:[%s14 + $0x55c] sm:$0xff]
  %v9957 = vld [vmem:[%s14 + $0x564] sm:$0xff]
  %v9958 = vld [vmem:[%s14 + $0x56c] sm:$0xff]
  %v9959 = vld [vmem:[%s14 + $0x574] sm:$0xf]
  %v9960 = vld [vmem:[%s14 + $0x578] sm:$0xff]
  %v9961 = vld [vmem:[%s14 + $0x580] sm:$0xff]
  %v9962 = vld [vmem:[%s14 + $0x588] sm:$0xff]
  %v9963 = vld [vmem:[%s14 + $0x590] sm:$0xf]
  %v9964 = vld [vmem:[%s14 + $0x594] sm:$0xff]
  %v9965 = vld [vmem:[%s14 + $0x59c] sm:$0xff]
  %v9966 = vld [vmem:[%s14 + $0x5a4] sm:$0xff]
  %v9967 = vld [vmem:[%s14 + $0x5ac] sm:$0xf]
  %v9968 = vld [vmem:[%s14 + $0x5b0] sm:$0xff]
  %v9969 = vld [vmem:[%s14 + $0x5b8] sm:$0xff]
  %v9970 = vld [vmem:[%s14 + $0x5c0] sm:$0xff]
  %v9971 = vld [vmem:[%s14 + $0x5c8] sm:$0xf]
  %v9972 = vld [vmem:[%s14 + $0x5cc] sm:$0xff]
  %v9973 = vld [vmem:[%s14 + $0x5d4] sm:$0xff]
  %v9974 = vld [vmem:[%s14 + $0x5dc] sm:$0xff]
  %v9975 = vld [vmem:[%s14 + $0x5e4] sm:$0xf]
  %v9976 = vld [vmem:[%s14 + $0x5e8] sm:$0xff]
  %v9977 = vld [vmem:[%s14 + $0x5f0] sm:$0xff]
  %v9978 = vld [vmem:[%s14 + $0x5f8] sm:$0xff]
  %v9979 = vld [vmem:[%s14 + $0x600] sm:$0xf]
  %v9980 = vld [vmem:[%s14 + $0x604] sm:$0xff]
  %v9981 = vld [vmem:[%s14 + $0x60c] sm:$0xff]
  %v9982 = vld [vmem:[%s14 + $0x614] sm:$0xff]
  %v9983 = vld [vmem:[%s14 + $0x61c] sm:$0xf]
  %v9984 = vld [vmem:[%s14 + $0x620] sm:$0xff]
  %v9985 = vld [vmem:[%s14 + $0x628] sm:$0xff]
  %v9986 = vld [vmem:[%s14 + $0x630] sm:$0xff]
  %v9987 = vld [vmem:[%s14 + $0x638] sm:$0xf]
  %v9988 = vld [vmem:[%s14 + $0x63c] sm:$0xff]
  %v9989 = vld [vmem:[%s14 + $0x644] sm:$0xff]
  %v9990 = vld [vmem:[%s14 + $0x64c] sm:$0xff]
  %v9991 = vld [vmem:[%s14 + $0x654] sm:$0xf]
  %v9992 = vld [vmem:[%s14 + $0x658] sm:$0xff]
  %v9993 = vld [vmem:[%s14 + $0x660] sm:$0xff]
  %v9994 = vld [vmem:[%s14 + $0x668] sm:$0xff]
  %v9995 = vld [vmem:[%s14 + $0x670] sm:$0xf]
  %v9996 = vld [vmem:[%s14 + $0x674] sm:$0xff]
  %v9997 = vld [vmem:[%s14 + $0x67c] sm:$0xff]
  %v9998 = vld [vmem:[%s14 + $0x684] sm:$0xff]
  %v9999 = vld [vmem:[%s14 + $0x68c] sm:$0xf]
  %v10000 = vld [vmem:[%s14 + $0x690] sm:$0xff]
  %v10001 = vld [vmem:[%s14 + $0x698] sm:$0xff]
  %v10002 = vld [vmem:[%s14 + $0x6a0] sm:$0xff]
  %v10003 = vld [vmem:[%s14 + $0x6a8] sm:$0xf]
  %v10004 = vld [vmem:[%s14 + $0x6ac] sm:$0xff]
  %v10005 = vld [vmem:[%s14 + $0x6b4] sm:$0xff]
  %v10006 = vld [vmem:[%s14 + $0x6bc] sm:$0xff]
  %v10007 = vld [vmem:[%s14 + $0x6c4] sm:$0xf]
  %v10008 = vld [vmem:[%s14 + $0x6c8] sm:$0xff]
  %v10009 = vld [vmem:[%s14 + $0x6d0] sm:$0xff]
  %v10010 = vld [vmem:[%s14 + $0x6d8] sm:$0xff]
  %v10011 = vld [vmem:[%s14 + $0x6e0] sm:$0xf]
  %v10012 = vld [vmem:[%s14 + $0x6e4] sm:$0xff]
  %v10013 = vld [vmem:[%s14 + $0x6ec] sm:$0xff]
  %v10014 = vld [vmem:[%s14 + $0x6f4] sm:$0xff]
  %v10015 = vld [vmem:[%s14 + $0x6fc] sm:$0xf]
  %v10016 = vld [vmem:[%s14 + $0x700] sm:$0xff]
  %v10017 = vld [vmem:[%s14 + $0x708] sm:$0xff]
  %v10018 = vld [vmem:[%s14 + $0x710] sm:$0xff]
  %v10019 = vld [vmem:[%s14 + $0x718] sm:$0xf]
  %v10020 = vld [vmem:[%s14 + $0x71c] sm:$0xff]
  %v10021 = vld [vmem:[%s14 + $0x724] sm:$0xff]
  %v10022 = vld [vmem:[%s14 + $0x72c] sm:$0xff]
  %v10023 = vld [vmem:[%s14 + $0x734] sm:$0xf]
  %v10024 = vld [vmem:[%s14 + $0x738] sm:$0xff]
  %v10025 = vld [vmem:[%s14 + $0x740] sm:$0xff]
  %v10026 = vld [vmem:[%s14 + $0x748] sm:$0xff]
  %v10027 = vld [vmem:[%s14 + $0x750] sm:$0xf]
  %v10028 = vld [vmem:[%s14 + $0x754] sm:$0xff]
  %v10029 = vld [vmem:[%s14 + $0x75c] sm:$0xff]
  %v10030 = vld [vmem:[%s14 + $0x764] sm:$0xff]
  %v10031 = vld [vmem:[%s14 + $0x76c] sm:$0xf]
  %v10032 = vld [vmem:[%s14 + $0x770] sm:$0xff]
  %v10033 = vld [vmem:[%s14 + $0x778] sm:$0xff]
  %v10034 = vld [vmem:[%s14 + $0x780] sm:$0xff]
  %v10035 = vld [vmem:[%s14 + $0x788] sm:$0xf]
  %v10036 = vld [vmem:[%s14 + $0x78c] sm:$0xff]
  %v10037 = vld [vmem:[%s14 + $0x794] sm:$0xff]
  %v10038 = vld [vmem:[%s14 + $0x79c] sm:$0xff]
  %v10039 = vld [vmem:[%s14 + $0x7a4] sm:$0xf]
  %v10040 = vld [vmem:[%s14 + $0x7a8] sm:$0xff]
  %v10041 = vld [vmem:[%s14 + $0x7b0] sm:$0xff]
  %v10042 = vld [vmem:[%s14 + $0x7b8] sm:$0xff]
  %v10043 = vld [vmem:[%s14 + $0x7c0] sm:$0xf]
  %v10044 = vld [vmem:[%s14 + $0x7c4] sm:$0xff]
  %v10045 = vld [vmem:[%s14 + $0x7cc] sm:$0xff]
  %v10046 = vld [vmem:[%s14 + $0x7d4] sm:$0xff]
  %v10047 = vld [vmem:[%s14 + $0x7dc] sm:$0xf]
  %v10048 = vld [vmem:[%s14 + $0x7e0] sm:$0xff]
  %v10049 = vld [vmem:[%s14 + $0x7e8] sm:$0xff]
  %v10050 = vld [vmem:[%s14 + $0x7f0] sm:$0xff]
  %v10051 = vld [vmem:[%s14 + $0x7f8] sm:$0xf]
  %v10052 = vld [vmem:[%s14 + $0x7fc] sm:$0xff]
  %v10053 = vld [vmem:[%s14 + $0x804] sm:$0xff]
  %v10054 = vld [vmem:[%s14 + $0x80c] sm:$0xff]
  %v10055 = vld [vmem:[%s14 + $0x814] sm:$0xf]
  %v10056 = vld [vmem:[%s14 + $0x818] sm:$0xff]
  %v10057 = vld [vmem:[%s14 + $0x820] sm:$0xff]
  %v10058 = vld [vmem:[%s14 + $0x828] sm:$0xff]
  %v10059 = vld [vmem:[%s14 + $0x830] sm:$0xf]
  %v10060 = vld [vmem:[%s14 + $0x834] sm:$0xff]
  %v10061 = vld [vmem:[%s14 + $0x83c] sm:$0xff]
  %v10062 = vld [vmem:[%s14 + $0x844] sm:$0xff]
  %v10063 = vld [vmem:[%s14 + $0x84c] sm:$0xf]
  %v10064 = vld [vmem:[%s14 + $0x850] sm:$0xff]
  %v10065 = vld [vmem:[%s14 + $0x858] sm:$0xff]
  %v10066 = vld [vmem:[%s14 + $0x860] sm:$0xff]
  %v10067 = vld [vmem:[%s14 + $0x868] sm:$0xf]
  %v10068 = vld [vmem:[%s14 + $0x86c] sm:$0xff]
  %v10069 = vld [vmem:[%s14 + $0x874] sm:$0xff]
  %v10070 = vld [vmem:[%s14 + $0x87c] sm:$0xff]
  %v10071 = vld [vmem:[%s14 + $0x884] sm:$0xf]
  %v10072 = vld [vmem:[%s14 + $0x888] sm:$0xff]
  %v10073 = vld [vmem:[%s14 + $0x890] sm:$0xff]
  %v10074 = vld [vmem:[%s14 + $0x898] sm:$0xff]
  %v10075 = vld [vmem:[%s14 + $0x8a0] sm:$0xf]
  %v10076 = vld [vmem:[%s14 + $0x8a4] sm:$0xff]
  %v10077 = vld [vmem:[%s14 + $0x8ac] sm:$0xff]
  %v10078 = vld [vmem:[%s14 + $0x8b4] sm:$0xff]
  %v10079 = vld [vmem:[%s14 + $0x8bc] sm:$0xf]
  %v10080 = vld [vmem:[%s14 + $0x8c0] sm:$0xff]
  %v10081 = vld [vmem:[%s14 + $0x8c8] sm:$0xff]
  %v10082 = vld [vmem:[%s14 + $0x8d0] sm:$0xff]
  %v10083 = vld [vmem:[%s14 + $0x8d8] sm:$0xf]
  %v10084 = vld [vmem:[%s14 + $0x8dc] sm:$0xff]
  %v10085 = vld [vmem:[%s14 + $0x8e4] sm:$0xff]
  %v10086 = vld [vmem:[%s14 + $0x8ec] sm:$0xff]
  %v10087 = vld [vmem:[%s14 + $0x8f4] sm:$0xf]
  %v10088 = vld [vmem:[%s14 + $0x8f8] sm:$0xff]
  %v10089 = vld [vmem:[%s14 + $0x900] sm:$0xff]
  %v10090 = vld [vmem:[%s14 + $0x908] sm:$0xff]
  %v10091 = vld [vmem:[%s14 + $0x910] sm:$0xf]
  %v10092 = vld [vmem:[%s14 + $0x914] sm:$0xff]
  %v10093 = vld [vmem:[%s14 + $0x91c] sm:$0xff]
  %v10094 = vld [vmem:[%s14 + $0x924] sm:$0xff]
  %v10095 = vld [vmem:[%s14 + $0x92c] sm:$0xf]
  %v10096 = vld [vmem:[%s14 + $0x930] sm:$0xff]
  %v10097 = vld [vmem:[%s14 + $0x938] sm:$0xff]
  %v10098 = vld [vmem:[%s14 + $0x940] sm:$0xff]
  %v10099 = vld [vmem:[%s14 + $0x948] sm:$0xf]
  %v10100 = vld [vmem:[%s14 + $0x94c] sm:$0xff]
  %v10101 = vld [vmem:[%s14 + $0x954] sm:$0xff]
  %v10102 = vld [vmem:[%s14 + $0x95c] sm:$0xff]
  %v10103 = vld [vmem:[%s14 + $0x964] sm:$0xf]
  %v10104 = vld [vmem:[%s14 + $0x968] sm:$0xff]
  %v10105 = vld [vmem:[%s14 + $0x970] sm:$0xff]
  %v10106 = vld [vmem:[%s14 + $0x978] sm:$0xff]
  %v10107 = vld [vmem:[%s14 + $0x980] sm:$0xf]
  %v10108 = vld [vmem:[%s14 + $0x984] sm:$0xff]
  %v10109 = vld [vmem:[%s14 + $0x98c] sm:$0xff]
  %v10110 = vld [vmem:[%s14 + $0x994] sm:$0xff]
  %v10111 = vld [vmem:[%s14 + $0x99c] sm:$0xf]
  %v10112 = vld [vmem:[%s14 + $0x9a0] sm:$0xff]
  %v10113 = vld [vmem:[%s14 + $0x9a8] sm:$0xff]
  %v10114 = vld [vmem:[%s14 + $0x9b0] sm:$0xff]
  %v10115 = vld [vmem:[%s14 + $0x9b8] sm:$0xf]
  %v10116 = vld [vmem:[%s14 + $0x9bc] sm:$0xff]
  %v10117 = vld [vmem:[%s14 + $0x9c4] sm:$0xff]
  %v10118 = vld [vmem:[%s14 + $0x9cc] sm:$0xff]
  %v10119 = vld [vmem:[%s14 + $0x9d4] sm:$0xf]
  %v10120 = vld [vmem:[%s14 + $0x9d8] sm:$0xff]
  %v10121 = vld [vmem:[%s14 + $0x9e0] sm:$0xff]
  %v10122 = vld [vmem:[%s14 + $0x9e8] sm:$0xff]
  %v10123 = vld [vmem:[%s14 + $0x9f0] sm:$0xf]
  %v10124 = vld [vmem:[%s14 + $0x9f4] sm:$0xff]
  %v10125 = vld [vmem:[%s14 + $0x9fc] sm:$0xff]
  %v10126 = vld [vmem:[%s14 + $0xa04] sm:$0xff]
  %v10127 = vld [vmem:[%s14 + $0xa0c] sm:$0xf]
  %v10128 = vld [vmem:[%s14 + $0xa10] sm:$0xff]
  %v10129 = vld [vmem:[%s14 + $0xa18] sm:$0xff]
  %v10130 = vld [vmem:[%s14 + $0xa20] sm:$0xff]
  %v10131 = vld [vmem:[%s14 + $0xa28] sm:$0xf]
  %v10132 = vld [vmem:[%s14 + $0xa2c] sm:$0xff]
  %v10133 = vld [vmem:[%s14 + $0xa34] sm:$0xff]
  %v10134 = vld [vmem:[%s14 + $0xa3c] sm:$0xff]
  %v10135 = vld [vmem:[%s14 + $0xa44] sm:$0xf]
  %v10136 = vld [vmem:[%s14 + $0xa48] sm:$0xff]
  %v10137 = vld [vmem:[%s14 + $0xa50] sm:$0xff]
  %v10138 = vld [vmem:[%s14 + $0xa58] sm:$0xff]
  %v10139 = vld [vmem:[%s14 + $0xa60] sm:$0xf]
  %v10140 = vld [vmem:[%s14 + $0xa64] sm:$0xff]
  %v10141 = vld [vmem:[%s14 + $0xa6c] sm:$0xff]
  %v10142 = vld [vmem:[%s14 + $0xa74] sm:$0xff]
  %v10143 = vld [vmem:[%s14 + $0xa7c] sm:$0xf]
  %v10144 = vld [vmem:[%s14 + $0xa80] sm:$0xff]
  %v10145 = vld [vmem:[%s14 + $0xa88] sm:$0xff]
  %v10146 = vld [vmem:[%s14 + $0xa90] sm:$0xff]
  %v10147 = vld [vmem:[%s14 + $0xa98] sm:$0xf]
  %v10148 = vld [vmem:[%s14 + $0xa9c] sm:$0xff]
  %v10149 = vld [vmem:[%s14 + $0xaa4] sm:$0xff]
  %v10150 = vld [vmem:[%s14 + $0xaac] sm:$0xff]
  %v10151 = vld [vmem:[%s14 + $0xab4] sm:$0xf]
  %v10152 = vld [vmem:[%s14 + $0xab8] sm:$0xff]
  %v10153 = vld [vmem:[%s14 + $0xac0] sm:$0xff]
  %v10154 = vld [vmem:[%s14 + $0xac8] sm:$0xff]
  %v10155 = vld [vmem:[%s14 + $0xad0] sm:$0xf]
  %v10156 = vld [vmem:[%s14 + $0xad4] sm:$0xff]
  %v10157 = vld [vmem:[%s14 + $0xadc] sm:$0xff]
  %v10158 = vld [vmem:[%s14 + $0xae4] sm:$0xff]
  %v10159 = vld [vmem:[%s14 + $0xaec] sm:$0xf]
  %v10160 = vld [vmem:[%s14 + $0xaf0] sm:$0xff]
  %v10161 = vld [vmem:[%s14 + $0xaf8] sm:$0xff]
  %v10162 = vld [vmem:[%s14 + $0xb00] sm:$0xff]
  %v10163 = vld [vmem:[%s14 + $0xb08] sm:$0xf]
  %v10164 = vld [vmem:[%s14 + $0xb0c] sm:$0xff]
  %v10165 = vld [vmem:[%s14 + $0xb14] sm:$0xff]
  %v10166 = vld [vmem:[%s14 + $0xb1c] sm:$0xff]
  %v10167 = vld [vmem:[%s14 + $0xb24] sm:$0xf]
  %v10168 = vld [vmem:[%s14 + $0xb28] sm:$0xff]
  %v10169 = vld [vmem:[%s14 + $0xb30] sm:$0xff]
  %v10170 = vld [vmem:[%s14 + $0xb38] sm:$0xff]
  %v10171 = vld [vmem:[%s14 + $0xb40] sm:$0xf]
  %v10172 = vld [vmem:[%s14 + $0xb44] sm:$0xff]
  %v10173 = vld [vmem:[%s14 + $0xb4c] sm:$0xff]
  %v10174 = vld [vmem:[%s14 + $0xb54] sm:$0xff]
  %v10175 = vld [vmem:[%s14 + $0xb5c] sm:$0xf]
  %v10176 = vld [vmem:[%s14 + $0xb60] sm:$0xff]
  %v10177 = vld [vmem:[%s14 + $0xb68] sm:$0xff]
  %v10178 = vld [vmem:[%s14 + $0xb70] sm:$0xff]
  %v10179 = vld [vmem:[%s14 + $0xb78] sm:$0xf]
  %v10180 = vld [vmem:[%s14 + $0xb7c] sm:$0xff]
  %v10181 = vld [vmem:[%s14 + $0xb84] sm:$0xff]
  %v10182 = vld [vmem:[%s14 + $0xb8c] sm:$0xff]
  %v10183 = vld [vmem:[%s14 + $0xb94] sm:$0xf]
  %v10184 = vld [vmem:[%s14 + $0xb98] sm:$0xff]
  %v10185 = vld [vmem:[%s14 + $0xba0] sm:$0xff]
  %v10186 = vld [vmem:[%s14 + $0xba8] sm:$0xff]
  %v10187 = vld [vmem:[%s14 + $0xbb0] sm:$0xf]
  %v10188 = vld [vmem:[%s14 + $0xbb4] sm:$0xff]
  %v10189 = vld [vmem:[%s14 + $0xbbc] sm:$0xff]
  %v10190 = vld [vmem:[%s14 + $0xbc4] sm:$0xff]
  %v10191 = vld [vmem:[%s14 + $0xbcc] sm:$0xf]
  %v10192 = vld [vmem:[%s14 + $0xbd0] sm:$0xff]
  %v10193 = vld [vmem:[%s14 + $0xbd8] sm:$0xff]
  %v10194 = vld [vmem:[%s14 + $0xbe0] sm:$0xff]
  %v10195 = vld [vmem:[%s14 + $0xbe8] sm:$0xf]
  %v10196 = vld [vmem:[%s14 + $0xbec] sm:$0xff]
  %v10197 = vld [vmem:[%s14 + $0xbf4] sm:$0xff]
  %v10198 = vld [vmem:[%s14 + $0xbfc] sm:$0xff]
  %v10199 = vld [vmem:[%s14 + $0xc04] sm:$0xf]
  %v10200 = vld [vmem:[%s14 + $0xc08] sm:$0xff]
  %v10201 = vld [vmem:[%s14 + $0xc10] sm:$0xff]
  %v10202 = vld [vmem:[%s14 + $0xc18] sm:$0xff]
  %v10203 = vld [vmem:[%s14 + $0xc20] sm:$0xf]
  %v10204 = vld [vmem:[%s14 + $0xc24] sm:$0xff]
  %v10205 = vld [vmem:[%s14 + $0xc2c] sm:$0xff]
  %v10206 = vld [vmem:[%s14 + $0xc34] sm:$0xff]
  %v10207 = vld [vmem:[%s14 + $0xc3c] sm:$0xf]
  %v10208 = vld [vmem:[%s14 + $0xc40] sm:$0xff]
  %v10209 = vld [vmem:[%s14 + $0xc48] sm:$0xff]
  %v10210 = vld [vmem:[%s14 + $0xc50] sm:$0xff]
  %v10211 = vld [vmem:[%s14 + $0xc58] sm:$0xf]
  %v10212 = vld [vmem:[%s14 + $0xc5c] sm:$0xff]
  %v10213 = vld [vmem:[%s14 + $0xc64] sm:$0xff]
  %v10214 = vld [vmem:[%s14 + $0xc6c] sm:$0xff]
  %v10215 = vld [vmem:[%s14 + $0xc74] sm:$0xf]
  %v10216 = vld [vmem:[%s14 + $0xc78] sm:$0xff]
  %v10217 = vld [vmem:[%s14 + $0xc80] sm:$0xff]
  %v10218 = vld [vmem:[%s14 + $0xc88] sm:$0xff]
  %v10219 = vld [vmem:[%s14 + $0xc90] sm:$0xf]
  %v10220 = vld [vmem:[%s14 + $0xc94] sm:$0xff]
  %v10221 = vld [vmem:[%s14 + $0xc9c] sm:$0xff]
  %v10222 = vld [vmem:[%s14 + $0xca4] sm:$0xff]
  %v10223 = vld [vmem:[%s14 + $0xcac] sm:$0xf]
  %v10224 = vld [vmem:[%s14 + $0xcb0] sm:$0xff]
  %v10225 = vld [vmem:[%s14 + $0xcb8] sm:$0xff]
  %v10226 = vld [vmem:[%s14 + $0xcc0] sm:$0xff]
  %v10227 = vld [vmem:[%s14 + $0xcc8] sm:$0xf]
  %v10228 = vld [vmem:[%s14 + $0xccc] sm:$0xff]
  %v10229 = vld [vmem:[%s14 + $0xcd4] sm:$0xff]
  %v10230 = vld [vmem:[%s14 + $0xcdc] sm:$0xff]
  %v10231 = vld [vmem:[%s14 + $0xce4] sm:$0xf]
  %v10232 = vld [vmem:[%s14 + $0xce8] sm:$0xff]
  %v10233 = vld [vmem:[%s14 + $0xcf0] sm:$0xff]
  %v10234 = vld [vmem:[%s14 + $0xcf8] sm:$0xff]
  %v10235 = vld [vmem:[%s14 + $0xd00] sm:$0xf]
  %v10236 = vld [vmem:[%s14 + $0xd04] sm:$0xff]
  %v10237 = vld [vmem:[%s14 + $0xd0c] sm:$0xff]
  %v10238 = vld [vmem:[%s14 + $0xd14] sm:$0xff]
  %v10239 = vld [vmem:[%s14 + $0xd1c] sm:$0xf]
  %v10240 = vld [vmem:[%s14 + $0xd20] sm:$0xff]
  %v10241 = vld [vmem:[%s14 + $0xd28] sm:$0xff]
  %v10242 = vld [vmem:[%s14 + $0xd30] sm:$0xff]
  %v10243 = vld [vmem:[%s14 + $0xd38] sm:$0xf]
  %v10244 = vld [vmem:[%s14 + $0xd3c] sm:$0xff]
  %v10245 = vld [vmem:[%s14 + $0xd44] sm:$0xff]
  %v10246 = vld [vmem:[%s14 + $0xd4c] sm:$0xff]
  %v10247 = vld [vmem:[%s14 + $0xd54] sm:$0xf]
  %v10248 = vld [vmem:[%s14 + $0xd58] sm:$0xff]
  %v10249 = vld [vmem:[%s14 + $0xd60] sm:$0xff]
  %v10250 = vld [vmem:[%s14 + $0xd68] sm:$0xff]
  %v10251 = vld [vmem:[%s14 + $0xd70] sm:$0xf]
  %v10252 = vld [vmem:[%s14 + $0xd74] sm:$0xff]
  %v10253 = vld [vmem:[%s14 + $0xd7c] sm:$0xff]
  %v10254 = vld [vmem:[%s14 + $0xd84] sm:$0xff]
  %v10255 = vld [vmem:[%s14 + $0xd8c] sm:$0xf]
  %v10256 = vld [vmem:[%s14 + $0xd90] sm:$0xff]
  %v10257 = vld [vmem:[%s14 + $0xd98] sm:$0xff]
  %v10258 = vld [vmem:[%s14 + $0xda0] sm:$0xff]
  %v10259 = vld [vmem:[%s14 + $0xda8] sm:$0xf]
  %v10260 = vld [vmem:[%s14 + $0xdac] sm:$0xff]
  %v10261 = vld [vmem:[%s14 + $0xdb4] sm:$0xff]
  %v10262 = vld [vmem:[%s14 + $0xdbc] sm:$0xff]
  %v10263 = vld [vmem:[%s14 + $0xdc4] sm:$0xf]
  %v10264 = vld [vmem:[%s14 + $0xdc8] sm:$0xff]
  %v10265 = vld [vmem:[%s14 + $0xdd0] sm:$0xff]
  %v10266 = vld [vmem:[%s14 + $0xdd8] sm:$0xff]
  %v10267 = vld [vmem:[%s14 + $0xde0] sm:$0xf]
  %v10268 = vld [vmem:[%s14 + $0xde4] sm:$0xff]
  %v10269 = vld [vmem:[%s14 + $0xdec] sm:$0xff]
  %v10270 = vld [vmem:[%s14 + $0xdf4] sm:$0xff]
  %v10271 = vld [vmem:[%s14 + $0xdfc] sm:$0xf]
  %v10272 = vld [vmem:[%s14 + $0xe00] sm:$0xff]
  %v10273 = vld [vmem:[%s14 + $0xe08] sm:$0xff]
  %v10274 = vld [vmem:[%s14 + $0xe10] sm:$0xff]
  %v10275 = vld [vmem:[%s14 + $0xe18] sm:$0xf]
  %v10276 = vld [vmem:[%s14 + $0xe1c] sm:$0xff]
  %v10277 = vld [vmem:[%s14 + $0xe24] sm:$0xff]
  %v10278 = vld [vmem:[%s14 + $0xe2c] sm:$0xff]
  %v10279 = vld [vmem:[%s14 + $0xe34] sm:$0xf]
  %v10280 = vld [vmem:[%s14 + $0xe38] sm:$0xff]
  %v10281 = vld [vmem:[%s14 + $0xe40] sm:$0xff]
  %v10282 = vld [vmem:[%s14 + $0xe48] sm:$0xff]
  %v10283 = vld [vmem:[%s14 + $0xe50] sm:$0xf]
  %v10284 = vld [vmem:[%s14 + $0xe54] sm:$0xff]
  %v10285 = vld [vmem:[%s14 + $0xe5c] sm:$0xff]
  %v10286 = vld [vmem:[%s14 + $0xe64] sm:$0xff]
  %v10287 = vld [vmem:[%s14 + $0xe6c] sm:$0xf]
  %v10288 = vld [vmem:[%s14 + $0xe70] sm:$0xff]
  %v10289 = vld [vmem:[%s14 + $0xe78] sm:$0xff]
  %v10290 = vld [vmem:[%s14 + $0xe80] sm:$0xff]
  %v10291 = vld [vmem:[%s14 + $0xe88] sm:$0xf]
  %v10292 = vld [vmem:[%s14 + $0xe8c] sm:$0xff]
  %v10293 = vld [vmem:[%s14 + $0xe94] sm:$0xff]
  %v10294 = vld [vmem:[%s14 + $0xe9c] sm:$0xff]
  %v10295 = vld [vmem:[%s14 + $0xea4] sm:$0xf]
  %v10296 = vld [vmem:[%s14 + $0xea8] sm:$0xff]
  %v10297 = vld [vmem:[%s14 + $0xeb0] sm:$0xff]
  %v10298 = vld [vmem:[%s14 + $0xeb8] sm:$0xff]
  %v10299 = vld [vmem:[%s14 + $0xec0] sm:$0xf]
  %v10300 = vld [vmem:[%s14 + $0xec4] sm:$0xff]
  %v10301 = vld [vmem:[%s14 + $0xecc] sm:$0xff]
  %v10302 = vld [vmem:[%s14 + $0xed4] sm:$0xff]
  %v10303 = vld [vmem:[%s14 + $0xedc] sm:$0xf]
  %v10304 = vld [vmem:[%s14 + $0xee0] sm:$0xff]
  %v10305 = vld [vmem:[%s14 + $0xee8] sm:$0xff]
  %v10306 = vld [vmem:[%s14 + $0xef0] sm:$0xff]
  %v10307 = vld [vmem:[%s14 + $0xef8] sm:$0xf]
  %v10308 = vld [vmem:[%s14 + $0xefc] sm:$0xff]
  %v10309 = vld [vmem:[%s14 + $0xf04] sm:$0xff]
  %v10310 = vld [vmem:[%s14 + $0xf0c] sm:$0xff]
  %v10311 = vld [vmem:[%s14 + $0xf14] sm:$0xf]
  %v10312 = vld [vmem:[%s14 + $0xf18] sm:$0xff]
  %v10313 = vld [vmem:[%s14 + $0xf20] sm:$0xff]
  %v10314 = vld [vmem:[%s14 + $0xf28] sm:$0xff]
  %v10315 = vld [vmem:[%s14 + $0xf30] sm:$0xf]
  %v10316 = vld [vmem:[%s14 + $0xf34] sm:$0xff]
  %v10317 = vld [vmem:[%s14 + $0xf3c] sm:$0xff]
  %v10318 = vld [vmem:[%s14 + $0xf44] sm:$0xff]
  %v10319 = vld [vmem:[%s14 + $0xf4c] sm:$0xf]
  %v10320 = vld [vmem:[%s14 + $0xf50] sm:$0xff]
  %v10321 = vld [vmem:[%s14 + $0xf58] sm:$0xff]
  %v10322 = vld [vmem:[%s14 + $0xf60] sm:$0xff]
  %v10323 = vld [vmem:[%s14 + $0xf68] sm:$0xf]
  %v10324 = vld [vmem:[%s14 + $0xf6c] sm:$0xff]
  %v10325 = vld [vmem:[%s14 + $0xf74] sm:$0xff]
  %v10326 = vld [vmem:[%s14 + $0xf7c] sm:$0xff]
  %v10327 = vld [vmem:[%s14 + $0xf84] sm:$0xf]
  %v10328 = vld [vmem:[%s14 + $0xf88] sm:$0xff]
  %v10329 = vld [vmem:[%s14 + $0xf90] sm:$0xff]
  %v10330 = vld [vmem:[%s14 + $0xf98] sm:$0xff]
  %v10331 = vld [vmem:[%s14 + $0xfa0] sm:$0xf]
  %v10332 = vld [vmem:[%s14 + $0xfa4] sm:$0xff]
  %v10333 = vld [vmem:[%s14 + $0xfac] sm:$0xff]
  %v10334 = vld [vmem:[%s14 + $0xfb4] sm:$0xff]
  %v10335 = vld [vmem:[%s14 + $0xfbc] sm:$0xf]
  %v10336 = vld [vmem:[%s14 + $0xfc0] sm:$0xff]
  %v10337 = vld [vmem:[%s14 + $0xfc8] sm:$0xff]
  %v10338 = vld [vmem:[%s14 + $0xfd0] sm:$0xff]
  %v10339 = vld [vmem:[%s14 + $0xfd8] sm:$0xf]
  %v10340 = vld [vmem:[%s14 + $0xfdc] sm:$0xff]
  %v10341 = vld [vmem:[%s14 + $0xfe4] sm:$0xff]
  %v10342 = vld [vmem:[%s14 + $0xfec] sm:$0xff]
  %v10343 = vld [vmem:[%s14 + $0xff4] sm:$0xf]
  %v10344 = vld [vmem:[%s14 + $0xff8] sm:$0xff]
  %v10345 = vld [vmem:[%s14 + $0x1000] sm:$0xff]
  %v10346 = vld [vmem:[%s14 + $0x1008] sm:$0xff]
  %v10347 = vld [vmem:[%s14 + $0x1010] sm:$0xf]
  %v10348 = vld [vmem:[%s14 + $0x1014] sm:$0xff]
  %v10349 = vld [vmem:[%s14 + $0x101c] sm:$0xff]
  %v10350 = vld [vmem:[%s14 + $0x1024] sm:$0xff]
  %v10351 = vld [vmem:[%s14 + $0x102c] sm:$0xf]
  %v10352 = vld [vmem:[%s14 + $0x1030] sm:$0xff]
  %v10353 = vld [vmem:[%s14 + $0x1038] sm:$0xff]
  %v10354 = vld [vmem:[%s14 + $0x1040] sm:$0xff]
  %v10355 = vld [vmem:[%s14 + $0x1048] sm:$0xf]
  %v10356 = vld [vmem:[%s14 + $0x104c] sm:$0xff]
  %v10357 = vld [vmem:[%s14 + $0x1054] sm:$0xff]
  %v10358 = vld [vmem:[%s14 + $0x105c] sm:$0xff]
  %v10359 = vld [vmem:[%s14 + $0x1064] sm:$0xf]
  %v10360 = vld [vmem:[%s14 + $0x1068] sm:$0xff]
  %v10361 = vld [vmem:[%s14 + $0x1070] sm:$0xff]
  %v10362 = vld [vmem:[%s14 + $0x1078] sm:$0xff]
  %v10363 = vld [vmem:[%s14 + $0x1080] sm:$0xf]
  %v10364 = vld [vmem:[%s14 + $0x1084] sm:$0xff]
  %v10365 = vld [vmem:[%s14 + $0x108c] sm:$0xff]
  %v10366 = vld [vmem:[%s14 + $0x1094] sm:$0xff]
  %v10367 = vld [vmem:[%s14 + $0x109c] sm:$0xf]
  %v10368 = vld [vmem:[%s14 + $0x10a0] sm:$0xff]
  %v10369 = vld [vmem:[%s14 + $0x10a8] sm:$0xff]
  %v10370 = vld [vmem:[%s14 + $0x10b0] sm:$0xff]
  %v10371 = vld [vmem:[%s14 + $0x10b8] sm:$0xf]
  %v10372 = vld [vmem:[%s14 + $0x10bc] sm:$0xff]
  %v10373 = vld [vmem:[%s14 + $0x10c4] sm:$0xff]
  %v10374 = vld [vmem:[%s14 + $0x10cc] sm:$0xff]
  %v10375 = vld [vmem:[%s14 + $0x10d4] sm:$0xf]
  %v10376 = vld [vmem:[%s14 + $0x10d8] sm:$0xff]
  %v10377 = vld [vmem:[%s14 + $0x10e0] sm:$0xff]
  %v10378 = vld [vmem:[%s14 + $0x10e8] sm:$0xff]
  %v10379 = vld [vmem:[%s14 + $0x10f0] sm:$0xf]
  %v10380 = vld [vmem:[%s14 + $0x10f4] sm:$0xff]
  %v10381 = vld [vmem:[%s14 + $0x10fc] sm:$0xff]
  %v10382 = vld [vmem:[%s14 + $0x1104] sm:$0xff]
  %v10383 = vld [vmem:[%s14 + $0x110c] sm:$0xf]
  %v10384 = vld [vmem:[%s14 + $0x1110] sm:$0xff]
  %v10385 = vld [vmem:[%s14 + $0x1118] sm:$0xff]
  %v10386 = vld [vmem:[%s14 + $0x1120] sm:$0xff]
  %v10387 = vld [vmem:[%s14 + $0x1128] sm:$0xf]
  %v10388 = vld [vmem:[%s14 + $0x112c] sm:$0xff]
  %v10389 = vld [vmem:[%s14 + $0x1134] sm:$0xff]
  %v10390 = vld [vmem:[%s14 + $0x113c] sm:$0xff]
  %v10391 = vld [vmem:[%s14 + $0x1144] sm:$0xf]
  %v10392 = vld [vmem:[%s14 + $0x1148] sm:$0xff]
  %v10393 = vld [vmem:[%s14 + $0x1150] sm:$0xff]
  %v10394 = vld [vmem:[%s14 + $0x1158] sm:$0xff]
  %v10395 = vld [vmem:[%s14 + $0x1160] sm:$0xf]
  %v10396 = vld [vmem:[%s14 + $0x1164] sm:$0xff]
  %v10397 = vld [vmem:[%s14 + $0x116c] sm:$0xff]
  %v10398 = vld [vmem:[%s14 + $0x1174] sm:$0xff]
  %v10399 = vld [vmem:[%s14 + $0x117c] sm:$0xf]
  %v10400 = vld [vmem:[%s14 + $0x1180] sm:$0xff]
  %v10401 = vld [vmem:[%s14 + $0x1188] sm:$0xff]
  %v10402 = vld [vmem:[%s14 + $0x1190] sm:$0xff]
  %v10403 = vld [vmem:[%s14 + $0x1198] sm:$0xf]
  %v10404 = vld [vmem:[%s14 + $0x119c] sm:$0xff]
  %v10405 = vld [vmem:[%s14 + $0x11a4] sm:$0xff]
  %v10406 = vld [vmem:[%s14 + $0x11ac] sm:$0xff]
  %v10407 = vld [vmem:[%s14 + $0x11b4] sm:$0xf]
  %v10408 = vld [vmem:[%s14 + $0x11b8] sm:$0xff]
  %v10409 = vld [vmem:[%s14 + $0x11c0] sm:$0xff]
  %v10410 = vld [vmem:[%s14 + $0x11c8] sm:$0xff]
  %v10411 = vld [vmem:[%s14 + $0x11d0] sm:$0xf]
  %v10412 = vld [vmem:[%s14 + $0x11d4] sm:$0xff]
  %v10413 = vld [vmem:[%s14 + $0x11dc] sm:$0xff]
  %v10414 = vld [vmem:[%s14 + $0x11e4] sm:$0xff]
  %v10415 = vld [vmem:[%s14 + $0x11ec] sm:$0xf]
  %v10416 = vld [vmem:[%s14 + $0x11f0] sm:$0xff]
  %v10417 = vld [vmem:[%s14 + $0x11f8] sm:$0xff]
  %v10418 = vld [vmem:[%s14 + $0x1200] sm:$0xff]
  %v10419 = vld [vmem:[%s14 + $0x1208] sm:$0xf]
  %v10420 = vld [vmem:[%s14 + $0x120c] sm:$0xff]
  %v10421 = vld [vmem:[%s14 + $0x1214] sm:$0xff]
  %v10422 = vld [vmem:[%s14 + $0x121c] sm:$0xff]
  %v10423 = vld [vmem:[%s14 + $0x1224] sm:$0xf]
  %v10424 = vld [vmem:[%s14 + $0x1228] sm:$0xff]
  %v10425 = vld [vmem:[%s14 + $0x1230] sm:$0xff]
  %v10426 = vld [vmem:[%s14 + $0x1238] sm:$0xff]
  %v10427 = vld [vmem:[%s14 + $0x1240] sm:$0xf]
  %v10428 = vld [vmem:[%s14 + $0x1244] sm:$0xff]
  %v10429 = vld [vmem:[%s14 + $0x124c] sm:$0xff]
  %v10430 = vld [vmem:[%s14 + $0x1254] sm:$0xff]
  %v10431 = vld [vmem:[%s14 + $0x125c] sm:$0xf]
  %v10432 = vld [vmem:[%s14 + $0x1260] sm:$0xff]
  %v10433 = vld [vmem:[%s14 + $0x1268] sm:$0xff]
  %v10434 = vld [vmem:[%s14 + $0x1270] sm:$0xff]
  %v10435 = vld [vmem:[%s14 + $0x1278] sm:$0xf]
  %v10436 = vld [vmem:[%s14 + $0x127c] sm:$0xff]
  %v10437 = vld [vmem:[%s14 + $0x1284] sm:$0xff]
  %v10438 = vld [vmem:[%s14 + $0x128c] sm:$0xff]
  %v10439 = vld [vmem:[%s14 + $0x1294] sm:$0xf]
  %v10440 = vld [vmem:[%s14 + $0x1298] sm:$0xff]
  %v10441 = vld [vmem:[%s14 + $0x12a0] sm:$0xff]
  %v10442 = vld [vmem:[%s14 + $0x12a8] sm:$0xff]
  %v10443 = vld [vmem:[%s14 + $0x12b0] sm:$0xf]
  %v10444 = vld [vmem:[%s14 + $0x12b4] sm:$0xff]
  %v10445 = vld [vmem:[%s14 + $0x12bc] sm:$0xff]
  %v10446 = vld [vmem:[%s14 + $0x12c4] sm:$0xff]
  %v10447 = vld [vmem:[%s14 + $0x12cc] sm:$0xf]
  %v10448 = vld [vmem:[%s14 + $0x12d0] sm:$0xff]
  %v10449 = vld [vmem:[%s14 + $0x12d8] sm:$0xff]
  %v10450 = vld [vmem:[%s14 + $0x12e0] sm:$0xff]
  %v10451 = vld [vmem:[%s14 + $0x12e8] sm:$0xf]
  %v10452 = vld [vmem:[%s14 + $0x12ec] sm:$0xff]
  %v10453 = vld [vmem:[%s14 + $0x12f4] sm:$0xff]
  %v10454 = vld [vmem:[%s14 + $0x12fc] sm:$0xff]
  %v10455 = vld [vmem:[%s14 + $0x1304] sm:$0xf]
  %v10456 = vld [vmem:[%s14 + $0x1308] sm:$0xff]
  %v10457 = vld [vmem:[%s14 + $0x1310] sm:$0xff]
  %v10458 = vld [vmem:[%s14 + $0x1318] sm:$0xff]
  %v10459 = vld [vmem:[%s14 + $0x1320] sm:$0xf]
  %v10460 = vld [vmem:[%s14 + $0x1324] sm:$0xff]
  %v10461 = vld [vmem:[%s14 + $0x132c] sm:$0xff]
  %v10462 = vld [vmem:[%s14 + $0x1334] sm:$0xff]
  %v10463 = vld [vmem:[%s14 + $0x133c] sm:$0xf]
  %v10464 = vld [vmem:[%s14 + $0x1340] sm:$0xff]
  %v10465 = vld [vmem:[%s14 + $0x1348] sm:$0xff]
  %v10466 = vld [vmem:[%s14 + $0x1350] sm:$0xff]
  %v10467 = vld [vmem:[%s14 + $0x1358] sm:$0xf]
  %v10468 = vld [vmem:[%s14 + $0x135c] sm:$0xff]
  %v10469 = vld [vmem:[%s14 + $0x1364] sm:$0xff]
  %v10470 = vld [vmem:[%s14 + $0x136c] sm:$0xff]
  %v10471 = vld [vmem:[%s14 + $0x1374] sm:$0xf]
  %v10472 = vld [vmem:[%s14 + $0x1378] sm:$0xff]
  %v10473 = vld [vmem:[%s14 + $0x1380] sm:$0xff]
  %v10474 = vld [vmem:[%s14 + $0x1388] sm:$0xff]
  %v10475 = vld [vmem:[%s14 + $0x1390] sm:$0xf]
  %v10476 = vld [vmem:[%s14 + $0x1394] sm:$0xff]
  %v10477 = vld [vmem:[%s14 + $0x139c] sm:$0xff]
  %v10478 = vld [vmem:[%s14 + $0x13a4] sm:$0xff]
  %v10479 = vld [vmem:[%s14 + $0x13ac] sm:$0xf]
  %v10480 = vld [vmem:[%s14 + $0x13b0] sm:$0xff]
  %v10481 = vld [vmem:[%s14 + $0x13b8] sm:$0xff]
  %v10482 = vld [vmem:[%s14 + $0x13c0] sm:$0xff]
  %v10483 = vld [vmem:[%s14 + $0x13c8] sm:$0xf]
  %v10484 = vld [vmem:[%s14 + $0x13cc] sm:$0xff]
  %v10485 = vld [vmem:[%s14 + $0x13d4] sm:$0xff]
  %v10486 = vld [vmem:[%s14 + $0x13dc] sm:$0xff]
  %v10487 = vld [vmem:[%s14 + $0x13e4] sm:$0xf]
  %v10488 = vld [vmem:[%s14 + $0x13e8] sm:$0xff]
  %v10489 = vld [vmem:[%s14 + $0x13f0] sm:$0xff]
  %v10490 = vld [vmem:[%s14 + $0x13f8] sm:$0xff]
  %v10491 = vld [vmem:[%s14 + $0x1400] sm:$0xf]
  %v10492 = vld [vmem:[%s14 + $0x1404] sm:$0xff]
  %v10493 = vld [vmem:[%s14 + $0x140c] sm:$0xff]
  %v10494 = vld [vmem:[%s14 + $0x1414] sm:$0xff]
  %v10495 = vld [vmem:[%s14 + $0x141c] sm:$0xf]
  %v10496 = vld [vmem:[%s14 + $0x1420] sm:$0xff]
  %v10497 = vld [vmem:[%s14 + $0x1428] sm:$0xff]
  %v10498 = vld [vmem:[%s14 + $0x1430] sm:$0xff]
  %v10499 = vld [vmem:[%s14 + $0x1438] sm:$0xf]
  %v10500 = vld [vmem:[%s14 + $0x143c] sm:$0xff]
  %v10501 = vld [vmem:[%s14 + $0x1444] sm:$0xff]
  %v10502 = vld [vmem:[%s14 + $0x144c] sm:$0xff]
  %v10503 = vld [vmem:[%s14 + $0x1454] sm:$0xf]
  %v10504 = vld [vmem:[%s14 + $0x1458] sm:$0xff]
  %v10505 = vld [vmem:[%s14 + $0x1460] sm:$0xff]
  %v10506 = vld [vmem:[%s14 + $0x1468] sm:$0xff]
  %v10507 = vld [vmem:[%s14 + $0x1470] sm:$0xf]
  %v10508 = vld [vmem:[%s14 + $0x1474] sm:$0xff]
  %v10509 = vld [vmem:[%s14 + $0x147c] sm:$0xff]
  %v10510 = vld [vmem:[%s14 + $0x1484] sm:$0xff]
  %v10511 = vld [vmem:[%s14 + $0x148c] sm:$0xf]
  %v10512 = vld [vmem:[%s14 + $0x1490] sm:$0xff]
  %v10513 = vld [vmem:[%s14 + $0x1498] sm:$0xff]
  %v10514 = vld [vmem:[%s14 + $0x14a0] sm:$0xff]
  %v10515 = vld [vmem:[%s14 + $0x14a8] sm:$0xf]
  %v10516 = vld [vmem:[%s14 + $0x14ac] sm:$0xff]
  %v10517 = vld [vmem:[%s14 + $0x14b4] sm:$0xff]
  %v10518 = vld [vmem:[%s14 + $0x14bc] sm:$0xff]
  %v10519 = vld [vmem:[%s14 + $0x14c4] sm:$0xf]
  %v10520 = vld [vmem:[%s14 + $0x14c8] sm:$0xff]
  %v10521 = vld [vmem:[%s14 + $0x14d0] sm:$0xff]
  %v10522 = vld [vmem:[%s14 + $0x14d8] sm:$0xff]
  %v10523 = vld [vmem:[%s14 + $0x14e0] sm:$0xf]
  %v10524 = vld [vmem:[%s14 + $0x14e4] sm:$0xff]
  %v10525 = vld [vmem:[%s14 + $0x14ec] sm:$0xff]
  %v10526 = vld [vmem:[%s14 + $0x14f4] sm:$0xff]
  %v10527 = vld [vmem:[%s14 + $0x14fc] sm:$0xf]
  %v10528 = vld [vmem:[%s14 + $0x1500] sm:$0xff]
  %v10529 = vld [vmem:[%s14 + $0x1508] sm:$0xff]
  %v10530 = vld [vmem:[%s14 + $0x1510] sm:$0xff]
  %v10531 = vld [vmem:[%s14 + $0x1518] sm:$0xf]
  %v10532 = vld [vmem:[%s14 + $0x151c] sm:$0xff]
  %v10533 = vld [vmem:[%s14 + $0x1524] sm:$0xff]
  %v10534 = vld [vmem:[%s14 + $0x152c] sm:$0xff]
  %v10535 = vld [vmem:[%s14 + $0x1534] sm:$0xf]
  %v10536 = vld [vmem:[%s14 + $0x1538] sm:$0xff]
  %v10537 = vld [vmem:[%s14 + $0x1540] sm:$0xff]
  %v10538 = vld [vmem:[%s14 + $0x1548] sm:$0xff]
  %v10539 = vld [vmem:[%s14 + $0x1550] sm:$0xf]
  %v10540 = vld [vmem:[%s14 + $0x1554] sm:$0xff]
  %v10541 = vld [vmem:[%s14 + $0x155c] sm:$0xff]
  %v10542 = vld [vmem:[%s14 + $0x1564] sm:$0xff]
  %v10543 = vld [vmem:[%s14 + $0x156c] sm:$0xf]
  %v10544 = vld [vmem:[%s14 + $0x1570] sm:$0xff]
  %v10545 = vld [vmem:[%s14 + $0x1578] sm:$0xff]
  %v10546 = vld [vmem:[%s14 + $0x1580] sm:$0xff]
  %v10547 = vld [vmem:[%s14 + $0x1588] sm:$0xf]
  %v10548 = vld [vmem:[%s14 + $0x158c] sm:$0xff]
  %v10549 = vld [vmem:[%s14 + $0x1594] sm:$0xff]
  %v10550 = vld [vmem:[%s14 + $0x159c] sm:$0xff]
  %v10551 = vld [vmem:[%s14 + $0x15a4] sm:$0xf]
  %v10552 = vld [vmem:[%s14 + $0x15a8] sm:$0xff]
  %v10553 = vld [vmem:[%s14 + $0x15b0] sm:$0xff]
  %v10554 = vld [vmem:[%s14 + $0x15b8] sm:$0xff]
  %v10555 = vld [vmem:[%s14 + $0x15c0] sm:$0xf]
  %v10556 = vld [vmem:[%s14 + $0x15c4] sm:$0xff]
  %v10557 = vld [vmem:[%s14 + $0x15cc] sm:$0xff]
  %v10558 = vld [vmem:[%s14 + $0x15d4] sm:$0xff]
  %v10559 = vld [vmem:[%s14 + $0x15dc] sm:$0xf]
  %v10560 = vld [vmem:[%s14 + $0x15e0] sm:$0xff]
  %v10561 = vld [vmem:[%s14 + $0x15e8] sm:$0xff]
  %v10562 = vld [vmem:[%s14 + $0x15f0] sm:$0xff]
  %v10563 = vld [vmem:[%s14 + $0x15f8] sm:$0xf]
  %v10564 = vld [vmem:[%s14 + $0x15fc] sm:$0xff]
  %v10565 = vld [vmem:[%s14 + $0x1604] sm:$0xff]
  %v10566 = vld [vmem:[%s14 + $0x160c] sm:$0xff]
  %v10567 = vld [vmem:[%s14 + $0x1614] sm:$0xf]
  %v10568 = vld [vmem:[%s14 + $0x1618] sm:$0xff]
  %v10569 = vld [vmem:[%s14 + $0x1620] sm:$0xff]
  %v10570 = vld [vmem:[%s14 + $0x1628] sm:$0xff]
  %v10571 = vld [vmem:[%s14 + $0x1630] sm:$0xf]
  %v10572 = vld [vmem:[%s14 + $0x1634] sm:$0xff]
  %v10573 = vld [vmem:[%s14 + $0x163c] sm:$0xff]
  %v10574 = vld [vmem:[%s14 + $0x1644] sm:$0xff]
  %v10575 = vld [vmem:[%s14 + $0x164c] sm:$0xf]
  %v10576 = vld [vmem:[%s14 + $0x1650] sm:$0xff]
  %v10577 = vld [vmem:[%s14 + $0x1658] sm:$0xff]
  %v10578 = vld [vmem:[%s14 + $0x1660] sm:$0xff]
  %v10579 = vld [vmem:[%s14 + $0x1668] sm:$0xf]
  %v10580 = vld [vmem:[%s14 + $0x166c] sm:$0xff]
  %v10581 = vld [vmem:[%s14 + $0x1674] sm:$0xff]
  %v10582 = vld [vmem:[%s14 + $0x167c] sm:$0xff]
  %v10583 = vld [vmem:[%s14 + $0x1684] sm:$0xf]
  %v10584 = vld [vmem:[%s14 + $0x1688] sm:$0xff]
  %v10585 = vld [vmem:[%s14 + $0x1690] sm:$0xff]
  %v10586 = vld [vmem:[%s14 + $0x1698] sm:$0xff]
  %v10587 = vld [vmem:[%s14 + $0x16a0] sm:$0xf]
  %v10588 = vld [vmem:[%s14 + $0x16a4] sm:$0xff]
  %v10589 = vld [vmem:[%s14 + $0x16ac] sm:$0xff]
  %v10590 = vld [vmem:[%s14 + $0x16b4] sm:$0xff]
  %v10591 = vld [vmem:[%s14 + $0x16bc] sm:$0xf]
  %v10592 = vld [vmem:[%s14 + $0x16c0] sm:$0xff]
  %v10593 = vld [vmem:[%s14 + $0x16c8] sm:$0xff]
  %v10594 = vld [vmem:[%s14 + $0x16d0] sm:$0xff]
  %v10595 = vld [vmem:[%s14 + $0x16d8] sm:$0xf]
  %v10596 = vld [vmem:[%s14 + $0x16dc] sm:$0xff]
  %v10597 = vld [vmem:[%s14 + $0x16e4] sm:$0xff]
  %v10598 = vld [vmem:[%s14 + $0x16ec] sm:$0xff]
  %v10599 = vld [vmem:[%s14 + $0x16f4] sm:$0xf]
  %v10600 = vld [vmem:[%s14 + $0x16f8] sm:$0xff]
  %v10601 = vld [vmem:[%s14 + $0x1700] sm:$0xff]
  %v10602 = vld [vmem:[%s14 + $0x1708] sm:$0xff]
  %v10603 = vld [vmem:[%s14 + $0x1710] sm:$0xf]
  %v10604 = vld [vmem:[%s14 + $0x1714] sm:$0xff]
  %v10605 = vld [vmem:[%s14 + $0x171c] sm:$0xff]
  %v10606 = vld [vmem:[%s14 + $0x1724] sm:$0xff]
  %v10607 = vld [vmem:[%s14 + $0x172c] sm:$0xf]
  %v10608 = vld [vmem:[%s14 + $0x1730] sm:$0xff]
  %v10609 = vld [vmem:[%s14 + $0x1738] sm:$0xff]
  %v10610 = vld [vmem:[%s14 + $0x1740] sm:$0xff]
  %v10611 = vld [vmem:[%s14 + $0x1748] sm:$0xf]
  %v10612 = vld [vmem:[%s14 + $0x174c] sm:$0xff]
  %v10613 = vld [vmem:[%s14 + $0x1754] sm:$0xff]
  %v10614 = vld [vmem:[%s14 + $0x175c] sm:$0xff]
  %v10615 = vld [vmem:[%s14 + $0x1764] sm:$0xf]
  %v10616 = vld [vmem:[%s14 + $0x1768] sm:$0xff]
  %v10617 = vld [vmem:[%s14 + $0x1770] sm:$0xff]
  %v10618 = vld [vmem:[%s14 + $0x1778] sm:$0xff]
  %v10619 = vld [vmem:[%s14 + $0x1780] sm:$0xf]
  %v10620 = vld [vmem:[%s14 + $0x1784] sm:$0xff]
  %v10621 = vld [vmem:[%s14 + $0x178c] sm:$0xff]
  %v10622 = vld [vmem:[%s14 + $0x1794] sm:$0xff]
  %v10623 = vld [vmem:[%s14 + $0x179c] sm:$0xf]
  %v10624 = vld [vmem:[%s14 + $0x17a0] sm:$0xff]
  %v10625 = vld [vmem:[%s14 + $0x17a8] sm:$0xff]
  %v10626 = vld [vmem:[%s14 + $0x17b0] sm:$0xff]
  %v10627 = vld [vmem:[%s14 + $0x17b8] sm:$0xf]
  %v10628 = vld [vmem:[%s14 + $0x17bc] sm:$0xff]
  %v10629 = vld [vmem:[%s14 + $0x17c4] sm:$0xff]
  %v10630 = vld [vmem:[%s14 + $0x17cc] sm:$0xff]
  %v10631 = vld [vmem:[%s14 + $0x17d4] sm:$0xf]
  %v10632 = vld [vmem:[%s14 + $0x17d8] sm:$0xff]
  %v10633 = vld [vmem:[%s14 + $0x17e0] sm:$0xff]
  %v10634 = vld [vmem:[%s14 + $0x17e8] sm:$0xff]
  %v10635 = vld [vmem:[%s14 + $0x17f0] sm:$0xf]
  %v10636 = vld [vmem:[%s14 + $0x17f4] sm:$0xff]
  %v10637 = vld [vmem:[%s14 + $0x17fc] sm:$0xff]
  %v10638 = vld [vmem:[%s14 + $0x1804] sm:$0xff]
  %v10639 = vld [vmem:[%s14 + $0x180c] sm:$0xf]
  %v10640 = vld [vmem:[%s14 + $0x1810] sm:$0xff]
  %v10641 = vld [vmem:[%s14 + $0x1818] sm:$0xff]
  %v10642 = vld [vmem:[%s14 + $0x1820] sm:$0xff]
  %v10643 = vld [vmem:[%s14 + $0x1828] sm:$0xf]
  %v10644 = vld [vmem:[%s14 + $0x182c] sm:$0xff]
  %v10645 = vld [vmem:[%s14 + $0x1834] sm:$0xff]
  %v10646 = vld [vmem:[%s14 + $0x183c] sm:$0xff]
  %v10647 = vld [vmem:[%s14 + $0x1844] sm:$0xf]
  %v10648 = vld [vmem:[%s14 + $0x1848] sm:$0xff]
  %v10649 = vld [vmem:[%s14 + $0x1850] sm:$0xff]
  %v10650 = vld [vmem:[%s14 + $0x1858] sm:$0xff]
  %v10651 = vld [vmem:[%s14 + $0x1860] sm:$0xf]
  %v10652 = vld [vmem:[%s14 + $0x1864] sm:$0xff]
  %v10653 = vld [vmem:[%s14 + $0x186c] sm:$0xff]
  %v10654 = vld [vmem:[%s14 + $0x1874] sm:$0xff]
  %v10655 = vld [vmem:[%s14 + $0x187c] sm:$0xf]
  %v10656 = vld [vmem:[%s14 + $0x1880] sm:$0xff]
  %v10657 = vld [vmem:[%s14 + $0x1888] sm:$0xff]
  %v10658 = vld [vmem:[%s14 + $0x1890] sm:$0xff]
  %v10659 = vld [vmem:[%s14 + $0x1898] sm:$0xf]
  %v10660 = vld [vmem:[%s15] sm:$0x7f]
  %v10662 = vlaneseq
  %v10663 = vshrl.u32 %v10662, 7
  %v10664 = vsub.s32 0, %v10663
  %v10665 = vrot.slane %v10660, %v10664
  %v10666 = vlaneseq
  %v10667 = vshrl.u32 %v10666, 7
  %v10668 = vsub.s32 1, %v10667
  %v10669 = vrot.slane %v10660, %v10668
  %v10670 = vlaneseq
  %v10671 = vshrl.u32 %v10670, 7
  %v10672 = vsub.s32 2, %v10671
  %v10673 = vrot.slane %v10660, %v10672
  %v10674 = vlaneseq
  %v10675 = vshrl.u32 %v10674, 7
  %v10676 = vsub.s32 3, %v10675
  %v10677 = vrot.slane %v10660, %v10676
  %v10678 = vlaneseq
  %v10679 = vshrl.u32 %v10678, 7
  %v10680 = vsub.s32 4, %v10679
  %v10681 = vrot.slane %v10660, %v10680
  %v10682 = vlaneseq
  %v10683 = vshrl.u32 %v10682, 7
  %v10684 = vsub.s32 5, %v10683
  %v10685 = vrot.slane %v10660, %v10684
  %v10686 = vlaneseq
  %v10687 = vshrl.u32 %v10686, 7
  %v10688 = vsub.s32 6, %v10687
  %v10689 = vrot.slane %v10660, %v10688
  %v11597 = vunpack.c.l.b16 %v9760
  %v11598 = vunpack.c.h.b16 %v9760
  %v11599 = vunpack.c.l.b16 %v9761
  %v11600 = vunpack.c.h.b16 %v9761
  %v11601 = vunpack.c.l.b16 %v9762
  %v11602 = vunpack.c.h.b16 %v9762
  %v11603 = vunpack.c.l.b16 %v9763
  %v11604 = vunpack.c.l.b16 %v9764
  %v11605 = vunpack.c.h.b16 %v9764
  %v11606 = vunpack.c.l.b16 %v9765
  %v11607 = vunpack.c.h.b16 %v9765
  %v11608 = vunpack.c.l.b16 %v9766
  %v11609 = vunpack.c.h.b16 %v9766
  %v11610 = vunpack.c.l.b16 %v9767
  %v11611 = vunpack.c.l.b16 %v9768
  %v11612 = vunpack.c.h.b16 %v9768
  %v11613 = vunpack.c.l.b16 %v9769
  %v11614 = vunpack.c.h.b16 %v9769
  %v11615 = vunpack.c.l.b16 %v9770
  %v11616 = vunpack.c.h.b16 %v9770
  %v11617 = vunpack.c.l.b16 %v9771
  %v11618 = vunpack.c.l.b16 %v9772
  %v11619 = vunpack.c.h.b16 %v9772
  %v11620 = vunpack.c.l.b16 %v9773
  %v11621 = vunpack.c.h.b16 %v9773
  %v11622 = vunpack.c.l.b16 %v9774
  %v11623 = vunpack.c.h.b16 %v9774
  %v11624 = vunpack.c.l.b16 %v9775
  %v11625 = vunpack.c.l.b16 %v9776
  %v11626 = vunpack.c.h.b16 %v9776
  %v11627 = vunpack.c.l.b16 %v9777
  %v11628 = vunpack.c.h.b16 %v9777
  %v11629 = vunpack.c.l.b16 %v9778
  %v11630 = vunpack.c.h.b16 %v9778
  %v11631 = vunpack.c.l.b16 %v9779
  %v11632 = vunpack.c.l.b16 %v9780
  %v11633 = vunpack.c.h.b16 %v9780
  %v11634 = vunpack.c.l.b16 %v9781
  %v11635 = vunpack.c.h.b16 %v9781
  %v11636 = vunpack.c.l.b16 %v9782
  %v11637 = vunpack.c.h.b16 %v9782
  %v11638 = vunpack.c.l.b16 %v9783
  %v11639 = vunpack.c.l.b16 %v9784
  %v11640 = vunpack.c.h.b16 %v9784
  %v11641 = vunpack.c.l.b16 %v9785
  %v11642 = vunpack.c.h.b16 %v9785
  %v11643 = vunpack.c.l.b16 %v9786
  %v11644 = vunpack.c.h.b16 %v9786
  %v11645 = vunpack.c.l.b16 %v9787
  %v11646 = vunpack.c.l.b16 %v9788
  %v11647 = vunpack.c.h.b16 %v9788
  %v11648 = vunpack.c.l.b16 %v9789
  %v11649 = vunpack.c.h.b16 %v9789
  %v11650 = vunpack.c.l.b16 %v9790
  %v11651 = vunpack.c.h.b16 %v9790
  %v11652 = vunpack.c.l.b16 %v9791
  %v11653 = vunpack.c.l.b16 %v9792
  %v11654 = vunpack.c.h.b16 %v9792
  %v11655 = vunpack.c.l.b16 %v9793
  %v11656 = vunpack.c.h.b16 %v9793
  %v11657 = vunpack.c.l.b16 %v9794
  %v11658 = vunpack.c.h.b16 %v9794
  %v11659 = vunpack.c.l.b16 %v9795
  %v11660 = vunpack.c.l.b16 %v9796
  %v11661 = vunpack.c.h.b16 %v9796
  %v11662 = vunpack.c.l.b16 %v9797
  %v11663 = vunpack.c.h.b16 %v9797
  %v11664 = vunpack.c.l.b16 %v9798
  %v11665 = vunpack.c.h.b16 %v9798
  %v11666 = vunpack.c.l.b16 %v9799
  %v11667 = vunpack.c.l.b16 %v9800
  %v11668 = vunpack.c.h.b16 %v9800
  %v11669 = vunpack.c.l.b16 %v9801
  %v11670 = vunpack.c.h.b16 %v9801
  %v11671 = vunpack.c.l.b16 %v9802
  %v11672 = vunpack.c.h.b16 %v9802
  %v11673 = vunpack.c.l.b16 %v9803
  %v11674 = vunpack.c.l.b16 %v9804
  %v11675 = vunpack.c.h.b16 %v9804
  %v11676 = vunpack.c.l.b16 %v9805
  %v11677 = vunpack.c.h.b16 %v9805
  %v11678 = vunpack.c.l.b16 %v9806
  %v11679 = vunpack.c.h.b16 %v9806
  %v11680 = vunpack.c.l.b16 %v9807
  %v11681 = vunpack.c.l.b16 %v9808
  %v11682 = vunpack.c.h.b16 %v9808
  %v11683 = vunpack.c.l.b16 %v9809
  %v11684 = vunpack.c.h.b16 %v9809
  %v11685 = vunpack.c.l.b16 %v9810
  %v11686 = vunpack.c.h.b16 %v9810
  %v11687 = vunpack.c.l.b16 %v9811
  %v11688 = vunpack.c.l.b16 %v9812
  %v11689 = vunpack.c.h.b16 %v9812
  %v11690 = vunpack.c.l.b16 %v9813
  %v11691 = vunpack.c.h.b16 %v9813
  %v11692 = vunpack.c.l.b16 %v9814
  %v11693 = vunpack.c.h.b16 %v9814
  %v11694 = vunpack.c.l.b16 %v9815
  %v11695 = vunpack.c.l.b16 %v9816
  %v11696 = vunpack.c.h.b16 %v9816
  %v11697 = vunpack.c.l.b16 %v9817
  %v11698 = vunpack.c.h.b16 %v9817
  %v11699 = vunpack.c.l.b16 %v9818
  %v11700 = vunpack.c.h.b16 %v9818
  %v11701 = vunpack.c.l.b16 %v9819
  %v11702 = vunpack.c.l.b16 %v9820
  %v11703 = vunpack.c.h.b16 %v9820
  %v11704 = vunpack.c.l.b16 %v9821
  %v11705 = vunpack.c.h.b16 %v9821
  %v11706 = vunpack.c.l.b16 %v9822
  %v11707 = vunpack.c.h.b16 %v9822
  %v11708 = vunpack.c.l.b16 %v9823
  %v11709 = vunpack.c.l.b16 %v9824
  %v11710 = vunpack.c.h.b16 %v9824
  %v11711 = vunpack.c.l.b16 %v9825
  %v11712 = vunpack.c.h.b16 %v9825
  %v11713 = vunpack.c.l.b16 %v9826
  %v11714 = vunpack.c.h.b16 %v9826
  %v11715 = vunpack.c.l.b16 %v9827
  %v11716 = vunpack.c.l.b16 %v9828
  %v11717 = vunpack.c.h.b16 %v9828
  %v11718 = vunpack.c.l.b16 %v9829
  %v11719 = vunpack.c.h.b16 %v9829
  %v11720 = vunpack.c.l.b16 %v9830
  %v11721 = vunpack.c.h.b16 %v9830
  %v11722 = vunpack.c.l.b16 %v9831
  %v11723 = vunpack.c.l.b16 %v9832
  %v11724 = vunpack.c.h.b16 %v9832
  %v11725 = vunpack.c.l.b16 %v9833
  %v11726 = vunpack.c.h.b16 %v9833
  %v11727 = vunpack.c.l.b16 %v9834
  %v11728 = vunpack.c.h.b16 %v9834
  %v11729 = vunpack.c.l.b16 %v9835
  %v11730 = vunpack.c.l.b16 %v9836
  %v11731 = vunpack.c.h.b16 %v9836
  %v11732 = vunpack.c.l.b16 %v9837
  %v11733 = vunpack.c.h.b16 %v9837
  %v11734 = vunpack.c.l.b16 %v9838
  %v11735 = vunpack.c.h.b16 %v9838
  %v11736 = vunpack.c.l.b16 %v9839
  %v11737 = vunpack.c.l.b16 %v9840
  %v11738 = vunpack.c.h.b16 %v9840
  %v11739 = vunpack.c.l.b16 %v9841
  %v11740 = vunpack.c.h.b16 %v9841
  %v11741 = vunpack.c.l.b16 %v9842
  %v11742 = vunpack.c.h.b16 %v9842
  %v11743 = vunpack.c.l.b16 %v9843
  %v11744 = vunpack.c.l.b16 %v9844
  %v11745 = vunpack.c.h.b16 %v9844
  %v11746 = vunpack.c.l.b16 %v9845
  %v11747 = vunpack.c.h.b16 %v9845
  %v11748 = vunpack.c.l.b16 %v9846
  %v11749 = vunpack.c.h.b16 %v9846
  %v11750 = vunpack.c.l.b16 %v9847
  %v11751 = vunpack.c.l.b16 %v9848
  %v11752 = vunpack.c.h.b16 %v9848
  %v11753 = vunpack.c.l.b16 %v9849
  %v11754 = vunpack.c.h.b16 %v9849
  %v11755 = vunpack.c.l.b16 %v9850
  %v11756 = vunpack.c.h.b16 %v9850
  %v11757 = vunpack.c.l.b16 %v9851
  %v11758 = vunpack.c.l.b16 %v9852
  %v11759 = vunpack.c.h.b16 %v9852
  %v11760 = vunpack.c.l.b16 %v9853
  %v11761 = vunpack.c.h.b16 %v9853
  %v11762 = vunpack.c.l.b16 %v9854
  %v11763 = vunpack.c.h.b16 %v9854
  %v11764 = vunpack.c.l.b16 %v9855
  %v11765 = vunpack.c.l.b16 %v9856
  %v11766 = vunpack.c.h.b16 %v9856
  %v11767 = vunpack.c.l.b16 %v9857
  %v11768 = vunpack.c.h.b16 %v9857
  %v11769 = vunpack.c.l.b16 %v9858
  %v11770 = vunpack.c.h.b16 %v9858
  %v11771 = vunpack.c.l.b16 %v9859
  %v11772 = vunpack.c.l.b16 %v9860
  %v11773 = vunpack.c.h.b16 %v9860
  %v11774 = vunpack.c.l.b16 %v9861
  %v11775 = vunpack.c.h.b16 %v9861
  %v11776 = vunpack.c.l.b16 %v9862
  %v11777 = vunpack.c.h.b16 %v9862
  %v11778 = vunpack.c.l.b16 %v9863
  %v11779 = vunpack.c.l.b16 %v9864
  %v11780 = vunpack.c.h.b16 %v9864
  %v11781 = vunpack.c.l.b16 %v9865
  %v11782 = vunpack.c.h.b16 %v9865
  %v11783 = vunpack.c.l.b16 %v9866
  %v11784 = vunpack.c.h.b16 %v9866
  %v11785 = vunpack.c.l.b16 %v9867
  %v11786 = vunpack.c.l.b16 %v9868
  %v11787 = vunpack.c.h.b16 %v9868
  %v11788 = vunpack.c.l.b16 %v9869
  %v11789 = vunpack.c.h.b16 %v9869
  %v11790 = vunpack.c.l.b16 %v9870
  %v11791 = vunpack.c.h.b16 %v9870
  %v11792 = vunpack.c.l.b16 %v9871
  %v11793 = vunpack.c.l.b16 %v9872
  %v11794 = vunpack.c.h.b16 %v9872
  %v11795 = vunpack.c.l.b16 %v9873
  %v11796 = vunpack.c.h.b16 %v9873
  %v11797 = vunpack.c.l.b16 %v9874
  %v11798 = vunpack.c.h.b16 %v9874
  %v11799 = vunpack.c.l.b16 %v9875
  %v11800 = vunpack.c.l.b16 %v9876
  %v11801 = vunpack.c.h.b16 %v9876
  %v11802 = vunpack.c.l.b16 %v9877
  %v11803 = vunpack.c.h.b16 %v9877
  %v11804 = vunpack.c.l.b16 %v9878
  %v11805 = vunpack.c.h.b16 %v9878
  %v11806 = vunpack.c.l.b16 %v9879
  %v11807 = vunpack.c.l.b16 %v9880
  %v11808 = vunpack.c.h.b16 %v9880
  %v11809 = vunpack.c.l.b16 %v9881
  %v11810 = vunpack.c.h.b16 %v9881
  %v11811 = vunpack.c.l.b16 %v9882
  %v11812 = vunpack.c.h.b16 %v9882
  %v11813 = vunpack.c.l.b16 %v9883
  %v11814 = vunpack.c.l.b16 %v9884
  %v11815 = vunpack.c.h.b16 %v9884
  %v11816 = vunpack.c.l.b16 %v9885
  %v11817 = vunpack.c.h.b16 %v9885
  %v11818 = vunpack.c.l.b16 %v9886
  %v11819 = vunpack.c.h.b16 %v9886
  %v11820 = vunpack.c.l.b16 %v9887
  %v11821 = vunpack.c.l.b16 %v9888
  %v11822 = vunpack.c.h.b16 %v9888
  %v11823 = vunpack.c.l.b16 %v9889
  %v11824 = vunpack.c.h.b16 %v9889
  %v11825 = vunpack.c.l.b16 %v9890
  %v11826 = vunpack.c.h.b16 %v9890
  %v11827 = vunpack.c.l.b16 %v9891
  %v11828 = vunpack.c.l.b16 %v9892
  %v11829 = vunpack.c.h.b16 %v9892
  %v11830 = vunpack.c.l.b16 %v9893
  %v11831 = vunpack.c.h.b16 %v9893
  %v11832 = vunpack.c.l.b16 %v9894
  %v11833 = vunpack.c.h.b16 %v9894
  %v11834 = vunpack.c.l.b16 %v9895
  %v11835 = vunpack.c.l.b16 %v9896
  %v11836 = vunpack.c.h.b16 %v9896
  %v11837 = vunpack.c.l.b16 %v9897
  %v11838 = vunpack.c.h.b16 %v9897
  %v11839 = vunpack.c.l.b16 %v9898
  %v11840 = vunpack.c.h.b16 %v9898
  %v11841 = vunpack.c.l.b16 %v9899
  %v11842 = vunpack.c.l.b16 %v9900
  %v11843 = vunpack.c.h.b16 %v9900
  %v11844 = vunpack.c.l.b16 %v9901
  %v11845 = vunpack.c.h.b16 %v9901
  %v11846 = vunpack.c.l.b16 %v9902
  %v11847 = vunpack.c.h.b16 %v9902
  %v11848 = vunpack.c.l.b16 %v9903
  %v11849 = vunpack.c.l.b16 %v9904
  %v11850 = vunpack.c.h.b16 %v9904
  %v11851 = vunpack.c.l.b16 %v9905
  %v11852 = vunpack.c.h.b16 %v9905
  %v11853 = vunpack.c.l.b16 %v9906
  %v11854 = vunpack.c.h.b16 %v9906
  %v11855 = vunpack.c.l.b16 %v9907
  %v11856 = vunpack.c.l.b16 %v9908
  %v11857 = vunpack.c.h.b16 %v9908
  %v11858 = vunpack.c.l.b16 %v9909
  %v11859 = vunpack.c.h.b16 %v9909
  %v11860 = vunpack.c.l.b16 %v9910
  %v11861 = vunpack.c.h.b16 %v9910
  %v11862 = vunpack.c.l.b16 %v9911
  %v11863 = vunpack.c.l.b16 %v9912
  %v11864 = vunpack.c.h.b16 %v9912
  %v11865 = vunpack.c.l.b16 %v9913
  %v11866 = vunpack.c.h.b16 %v9913
  %v11867 = vunpack.c.l.b16 %v9914
  %v11868 = vunpack.c.h.b16 %v9914
  %v11869 = vunpack.c.l.b16 %v9915
  %v11870 = vunpack.c.l.b16 %v9916
  %v11871 = vunpack.c.h.b16 %v9916
  %v11872 = vunpack.c.l.b16 %v9917
  %v11873 = vunpack.c.h.b16 %v9917
  %v11874 = vunpack.c.l.b16 %v9918
  %v11875 = vunpack.c.h.b16 %v9918
  %v11876 = vunpack.c.l.b16 %v9919
  %v11877 = vunpack.c.l.b16 %v9920
  %v11878 = vunpack.c.h.b16 %v9920
  %v11879 = vunpack.c.l.b16 %v9921
  %v11880 = vunpack.c.h.b16 %v9921
  %v11881 = vunpack.c.l.b16 %v9922
  %v11882 = vunpack.c.h.b16 %v9922
  %v11883 = vunpack.c.l.b16 %v9923
  %v11884 = vunpack.c.l.b16 %v9924
  %v11885 = vunpack.c.h.b16 %v9924
  %v11886 = vunpack.c.l.b16 %v9925
  %v11887 = vunpack.c.h.b16 %v9925
  %v11888 = vunpack.c.l.b16 %v9926
  %v11889 = vunpack.c.h.b16 %v9926
  %v11890 = vunpack.c.l.b16 %v9927
  %v11891 = vunpack.c.l.b16 %v9928
  %v11892 = vunpack.c.h.b16 %v9928
  %v11893 = vunpack.c.l.b16 %v9929
  %v11894 = vunpack.c.h.b16 %v9929
  %v11895 = vunpack.c.l.b16 %v9930
  %v11896 = vunpack.c.h.b16 %v9930
  %v11897 = vunpack.c.l.b16 %v9931
  %v11898 = vunpack.c.l.b16 %v9932
  %v11899 = vunpack.c.h.b16 %v9932
  %v11900 = vunpack.c.l.b16 %v9933
  %v11901 = vunpack.c.h.b16 %v9933
  %v11902 = vunpack.c.l.b16 %v9934
  %v11903 = vunpack.c.h.b16 %v9934
  %v11904 = vunpack.c.l.b16 %v9935
  %v11905 = vunpack.c.l.b16 %v9936
  %v11906 = vunpack.c.h.b16 %v9936
  %v11907 = vunpack.c.l.b16 %v9937
  %v11908 = vunpack.c.h.b16 %v9937
  %v11909 = vunpack.c.l.b16 %v9938
  %v11910 = vunpack.c.h.b16 %v9938
  %v11911 = vunpack.c.l.b16 %v9939
  %v11912 = vunpack.c.l.b16 %v9940
  %v11913 = vunpack.c.h.b16 %v9940
  %v11914 = vunpack.c.l.b16 %v9941
  %v11915 = vunpack.c.h.b16 %v9941
  %v11916 = vunpack.c.l.b16 %v9942
  %v11917 = vunpack.c.h.b16 %v9942
  %v11918 = vunpack.c.l.b16 %v9943
  %v11919 = vunpack.c.l.b16 %v9944
  %v11920 = vunpack.c.h.b16 %v9944
  %v11921 = vunpack.c.l.b16 %v9945
  %v11922 = vunpack.c.h.b16 %v9945
  %v11923 = vunpack.c.l.b16 %v9946
  %v11924 = vunpack.c.h.b16 %v9946
  %v11925 = vunpack.c.l.b16 %v9947
  %v11926 = vunpack.c.l.b16 %v9948
  %v11927 = vunpack.c.h.b16 %v9948
  %v11928 = vunpack.c.l.b16 %v9949
  %v11929 = vunpack.c.h.b16 %v9949
  %v11930 = vunpack.c.l.b16 %v9950
  %v11931 = vunpack.c.h.b16 %v9950
  %v11932 = vunpack.c.l.b16 %v9951
  %v11933 = vunpack.c.l.b16 %v9952
  %v11934 = vunpack.c.h.b16 %v9952
  %v11935 = vunpack.c.l.b16 %v9953
  %v11936 = vunpack.c.h.b16 %v9953
  %v11937 = vunpack.c.l.b16 %v9954
  %v11938 = vunpack.c.h.b16 %v9954
  %v11939 = vunpack.c.l.b16 %v9955
  %v11940 = vunpack.c.l.b16 %v9956
  %v11941 = vunpack.c.h.b16 %v9956
  %v11942 = vunpack.c.l.b16 %v9957
  %v11943 = vunpack.c.h.b16 %v9957
  %v11944 = vunpack.c.l.b16 %v9958
  %v11945 = vunpack.c.h.b16 %v9958
  %v11946 = vunpack.c.l.b16 %v9959
  %v11947 = vunpack.c.l.b16 %v9960
  %v11948 = vunpack.c.h.b16 %v9960
  %v11949 = vunpack.c.l.b16 %v9961
  %v11950 = vunpack.c.h.b16 %v9961
  %v11951 = vunpack.c.l.b16 %v9962
  %v11952 = vunpack.c.h.b16 %v9962
  %v11953 = vunpack.c.l.b16 %v9963
  %v11954 = vunpack.c.l.b16 %v9964
  %v11955 = vunpack.c.h.b16 %v9964
  %v11956 = vunpack.c.l.b16 %v9965
  %v11957 = vunpack.c.h.b16 %v9965
  %v11958 = vunpack.c.l.b16 %v9966
  %v11959 = vunpack.c.h.b16 %v9966
  %v11960 = vunpack.c.l.b16 %v9967
  %v11961 = vunpack.c.l.b16 %v9968
  %v11962 = vunpack.c.h.b16 %v9968
  %v11963 = vunpack.c.l.b16 %v9969
  %v11964 = vunpack.c.h.b16 %v9969
  %v11965 = vunpack.c.l.b16 %v9970
  %v11966 = vunpack.c.h.b16 %v9970
  %v11967 = vunpack.c.l.b16 %v9971
  %v11968 = vunpack.c.l.b16 %v9972
  %v11969 = vunpack.c.h.b16 %v9972
  %v11970 = vunpack.c.l.b16 %v9973
  %v11971 = vunpack.c.h.b16 %v9973
  %v11972 = vunpack.c.l.b16 %v9974
  %v11973 = vunpack.c.h.b16 %v9974
  %v11974 = vunpack.c.l.b16 %v9975
  %v11975 = vunpack.c.l.b16 %v9976
  %v11976 = vunpack.c.h.b16 %v9976
  %v11977 = vunpack.c.l.b16 %v9977
  %v11978 = vunpack.c.h.b16 %v9977
  %v11979 = vunpack.c.l.b16 %v9978
  %v11980 = vunpack.c.h.b16 %v9978
  %v11981 = vunpack.c.l.b16 %v9979
  %v11982 = vunpack.c.l.b16 %v9980
  %v11983 = vunpack.c.h.b16 %v9980
  %v11984 = vunpack.c.l.b16 %v9981
  %v11985 = vunpack.c.h.b16 %v9981
  %v11986 = vunpack.c.l.b16 %v9982
  %v11987 = vunpack.c.h.b16 %v9982
  %v11988 = vunpack.c.l.b16 %v9983
  %v11989 = vunpack.c.l.b16 %v9984
  %v11990 = vunpack.c.h.b16 %v9984
  %v11991 = vunpack.c.l.b16 %v9985
  %v11992 = vunpack.c.h.b16 %v9985
  %v11993 = vunpack.c.l.b16 %v9986
  %v11994 = vunpack.c.h.b16 %v9986
  %v11995 = vunpack.c.l.b16 %v9987
  %v11996 = vunpack.c.l.b16 %v9988
  %v11997 = vunpack.c.h.b16 %v9988
  %v11998 = vunpack.c.l.b16 %v9989
  %v11999 = vunpack.c.h.b16 %v9989
  %v12000 = vunpack.c.l.b16 %v9990
  %v12001 = vunpack.c.h.b16 %v9990
  %v12002 = vunpack.c.l.b16 %v9991
  %v12003 = vunpack.c.l.b16 %v9992
  %v12004 = vunpack.c.h.b16 %v9992
  %v12005 = vunpack.c.l.b16 %v9993
  %v12006 = vunpack.c.h.b16 %v9993
  %v12007 = vunpack.c.l.b16 %v9994
  %v12008 = vunpack.c.h.b16 %v9994
  %v12009 = vunpack.c.l.b16 %v9995
  %v12010 = vunpack.c.l.b16 %v9996
  %v12011 = vunpack.c.h.b16 %v9996
  %v12012 = vunpack.c.l.b16 %v9997
  %v12013 = vunpack.c.h.b16 %v9997
  %v12014 = vunpack.c.l.b16 %v9998
  %v12015 = vunpack.c.h.b16 %v9998
  %v12016 = vunpack.c.l.b16 %v9999
  %v12017 = vunpack.c.l.b16 %v10000
  %v12018 = vunpack.c.h.b16 %v10000
  %v12019 = vunpack.c.l.b16 %v10001
  %v12020 = vunpack.c.h.b16 %v10001
  %v12021 = vunpack.c.l.b16 %v10002
  %v12022 = vunpack.c.h.b16 %v10002
  %v12023 = vunpack.c.l.b16 %v10003
  %v12024 = vunpack.c.l.b16 %v10004
  %v12025 = vunpack.c.h.b16 %v10004
  %v12026 = vunpack.c.l.b16 %v10005
  %v12027 = vunpack.c.h.b16 %v10005
  %v12028 = vunpack.c.l.b16 %v10006
  %v12029 = vunpack.c.h.b16 %v10006
  %v12030 = vunpack.c.l.b16 %v10007
  %v12031 = vunpack.c.l.b16 %v10008
  %v12032 = vunpack.c.h.b16 %v10008
  %v12033 = vunpack.c.l.b16 %v10009
  %v12034 = vunpack.c.h.b16 %v10009
  %v12035 = vunpack.c.l.b16 %v10010
  %v12036 = vunpack.c.h.b16 %v10010
  %v12037 = vunpack.c.l.b16 %v10011
  %v12038 = vunpack.c.l.b16 %v10012
  %v12039 = vunpack.c.h.b16 %v10012
  %v12040 = vunpack.c.l.b16 %v10013
  %v12041 = vunpack.c.h.b16 %v10013
  %v12042 = vunpack.c.l.b16 %v10014
  %v12043 = vunpack.c.h.b16 %v10014
  %v12044 = vunpack.c.l.b16 %v10015
  %v12045 = vunpack.c.l.b16 %v10016
  %v12046 = vunpack.c.h.b16 %v10016
  %v12047 = vunpack.c.l.b16 %v10017
  %v12048 = vunpack.c.h.b16 %v10017
  %v12049 = vunpack.c.l.b16 %v10018
  %v12050 = vunpack.c.h.b16 %v10018
  %v12051 = vunpack.c.l.b16 %v10019
  %v12052 = vunpack.c.l.b16 %v10020
  %v12053 = vunpack.c.h.b16 %v10020
  %v12054 = vunpack.c.l.b16 %v10021
  %v12055 = vunpack.c.h.b16 %v10021
  %v12056 = vunpack.c.l.b16 %v10022
  %v12057 = vunpack.c.h.b16 %v10022
  %v12058 = vunpack.c.l.b16 %v10023
  %v12059 = vunpack.c.l.b16 %v10024
  %v12060 = vunpack.c.h.b16 %v10024
  %v12061 = vunpack.c.l.b16 %v10025
  %v12062 = vunpack.c.h.b16 %v10025
  %v12063 = vunpack.c.l.b16 %v10026
  %v12064 = vunpack.c.h.b16 %v10026
  %v12065 = vunpack.c.l.b16 %v10027
  %v12066 = vunpack.c.l.b16 %v10028
  %v12067 = vunpack.c.h.b16 %v10028
  %v12068 = vunpack.c.l.b16 %v10029
  %v12069 = vunpack.c.h.b16 %v10029
  %v12070 = vunpack.c.l.b16 %v10030
  %v12071 = vunpack.c.h.b16 %v10030
  %v12072 = vunpack.c.l.b16 %v10031
  %v12073 = vunpack.c.l.b16 %v10032
  %v12074 = vunpack.c.h.b16 %v10032
  %v12075 = vunpack.c.l.b16 %v10033
  %v12076 = vunpack.c.h.b16 %v10033
  %v12077 = vunpack.c.l.b16 %v10034
  %v12078 = vunpack.c.h.b16 %v10034
  %v12079 = vunpack.c.l.b16 %v10035
  %v12080 = vunpack.c.l.b16 %v10036
  %v12081 = vunpack.c.h.b16 %v10036
  %v12082 = vunpack.c.l.b16 %v10037
  %v12083 = vunpack.c.h.b16 %v10037
  %v12084 = vunpack.c.l.b16 %v10038
  %v12085 = vunpack.c.h.b16 %v10038
  %v12086 = vunpack.c.l.b16 %v10039
  %v12087 = vunpack.c.l.b16 %v10040
  %v12088 = vunpack.c.h.b16 %v10040
  %v12089 = vunpack.c.l.b16 %v10041
  %v12090 = vunpack.c.h.b16 %v10041
  %v12091 = vunpack.c.l.b16 %v10042
  %v12092 = vunpack.c.h.b16 %v10042
  %v12093 = vunpack.c.l.b16 %v10043
  %v12094 = vunpack.c.l.b16 %v10044
  %v12095 = vunpack.c.h.b16 %v10044
  %v12096 = vunpack.c.l.b16 %v10045
  %v12097 = vunpack.c.h.b16 %v10045
  %v12098 = vunpack.c.l.b16 %v10046
  %v12099 = vunpack.c.h.b16 %v10046
  %v12100 = vunpack.c.l.b16 %v10047
  %v12101 = vunpack.c.l.b16 %v10048
  %v12102 = vunpack.c.h.b16 %v10048
  %v12103 = vunpack.c.l.b16 %v10049
  %v12104 = vunpack.c.h.b16 %v10049
  %v12105 = vunpack.c.l.b16 %v10050
  %v12106 = vunpack.c.h.b16 %v10050
  %v12107 = vunpack.c.l.b16 %v10051
  %v12108 = vunpack.c.l.b16 %v10052
  %v12109 = vunpack.c.h.b16 %v10052
  %v12110 = vunpack.c.l.b16 %v10053
  %v12111 = vunpack.c.h.b16 %v10053
  %v12112 = vunpack.c.l.b16 %v10054
  %v12113 = vunpack.c.h.b16 %v10054
  %v12114 = vunpack.c.l.b16 %v10055
  %v12115 = vunpack.c.l.b16 %v10056
  %v12116 = vunpack.c.h.b16 %v10056
  %v12117 = vunpack.c.l.b16 %v10057
  %v12118 = vunpack.c.h.b16 %v10057
  %v12119 = vunpack.c.l.b16 %v10058
  %v12120 = vunpack.c.h.b16 %v10058
  %v12121 = vunpack.c.l.b16 %v10059
  %v12122 = vunpack.c.l.b16 %v10060
  %v12123 = vunpack.c.h.b16 %v10060
  %v12124 = vunpack.c.l.b16 %v10061
  %v12125 = vunpack.c.h.b16 %v10061
  %v12126 = vunpack.c.l.b16 %v10062
  %v12127 = vunpack.c.h.b16 %v10062
  %v12128 = vunpack.c.l.b16 %v10063
  %v12129 = vunpack.c.l.b16 %v10064
  %v12130 = vunpack.c.h.b16 %v10064
  %v12131 = vunpack.c.l.b16 %v10065
  %v12132 = vunpack.c.h.b16 %v10065
  %v12133 = vunpack.c.l.b16 %v10066
  %v12134 = vunpack.c.h.b16 %v10066
  %v12135 = vunpack.c.l.b16 %v10067
  %v12136 = vunpack.c.l.b16 %v10068
  %v12137 = vunpack.c.h.b16 %v10068
  %v12138 = vunpack.c.l.b16 %v10069
  %v12139 = vunpack.c.h.b16 %v10069
  %v12140 = vunpack.c.l.b16 %v10070
  %v12141 = vunpack.c.h.b16 %v10070
  %v12142 = vunpack.c.l.b16 %v10071
  %v12143 = vunpack.c.l.b16 %v10072
  %v12144 = vunpack.c.h.b16 %v10072
  %v12145 = vunpack.c.l.b16 %v10073
  %v12146 = vunpack.c.h.b16 %v10073
  %v12147 = vunpack.c.l.b16 %v10074
  %v12148 = vunpack.c.h.b16 %v10074
  %v12149 = vunpack.c.l.b16 %v10075
  %v12150 = vunpack.c.l.b16 %v10076
  %v12151 = vunpack.c.h.b16 %v10076
  %v12152 = vunpack.c.l.b16 %v10077
  %v12153 = vunpack.c.h.b16 %v10077
  %v12154 = vunpack.c.l.b16 %v10078
  %v12155 = vunpack.c.h.b16 %v10078
  %v12156 = vunpack.c.l.b16 %v10079
  %v12157 = vunpack.c.l.b16 %v10080
  %v12158 = vunpack.c.h.b16 %v10080
  %v12159 = vunpack.c.l.b16 %v10081
  %v12160 = vunpack.c.h.b16 %v10081
  %v12161 = vunpack.c.l.b16 %v10082
  %v12162 = vunpack.c.h.b16 %v10082
  %v12163 = vunpack.c.l.b16 %v10083
  %v12164 = vunpack.c.l.b16 %v10084
  %v12165 = vunpack.c.h.b16 %v10084
  %v12166 = vunpack.c.l.b16 %v10085
  %v12167 = vunpack.c.h.b16 %v10085
  %v12168 = vunpack.c.l.b16 %v10086
  %v12169 = vunpack.c.h.b16 %v10086
  %v12170 = vunpack.c.l.b16 %v10087
  %v12171 = vunpack.c.l.b16 %v10088
  %v12172 = vunpack.c.h.b16 %v10088
  %v12173 = vunpack.c.l.b16 %v10089
  %v12174 = vunpack.c.h.b16 %v10089
  %v12175 = vunpack.c.l.b16 %v10090
  %v12176 = vunpack.c.h.b16 %v10090
  %v12177 = vunpack.c.l.b16 %v10091
  %v12178 = vunpack.c.l.b16 %v10092
  %v12179 = vunpack.c.h.b16 %v10092
  %v12180 = vunpack.c.l.b16 %v10093
  %v12181 = vunpack.c.h.b16 %v10093
  %v12182 = vunpack.c.l.b16 %v10094
  %v12183 = vunpack.c.h.b16 %v10094
  %v12184 = vunpack.c.l.b16 %v10095
  %v12185 = vunpack.c.l.b16 %v10096
  %v12186 = vunpack.c.h.b16 %v10096
  %v12187 = vunpack.c.l.b16 %v10097
  %v12188 = vunpack.c.h.b16 %v10097
  %v12189 = vunpack.c.l.b16 %v10098
  %v12190 = vunpack.c.h.b16 %v10098
  %v12191 = vunpack.c.l.b16 %v10099
  %v12192 = vunpack.c.l.b16 %v10100
  %v12193 = vunpack.c.h.b16 %v10100
  %v12194 = vunpack.c.l.b16 %v10101
  %v12195 = vunpack.c.h.b16 %v10101
  %v12196 = vunpack.c.l.b16 %v10102
  %v12197 = vunpack.c.h.b16 %v10102
  %v12198 = vunpack.c.l.b16 %v10103
  %v12199 = vunpack.c.l.b16 %v10104
  %v12200 = vunpack.c.h.b16 %v10104
  %v12201 = vunpack.c.l.b16 %v10105
  %v12202 = vunpack.c.h.b16 %v10105
  %v12203 = vunpack.c.l.b16 %v10106
  %v12204 = vunpack.c.h.b16 %v10106
  %v12205 = vunpack.c.l.b16 %v10107
  %v12206 = vunpack.c.l.b16 %v10108
  %v12207 = vunpack.c.h.b16 %v10108
  %v12208 = vunpack.c.l.b16 %v10109
  %v12209 = vunpack.c.h.b16 %v10109
  %v12210 = vunpack.c.l.b16 %v10110
  %v12211 = vunpack.c.h.b16 %v10110
  %v12212 = vunpack.c.l.b16 %v10111
  %v12213 = vunpack.c.l.b16 %v10112
  %v12214 = vunpack.c.h.b16 %v10112
  %v12215 = vunpack.c.l.b16 %v10113
  %v12216 = vunpack.c.h.b16 %v10113
  %v12217 = vunpack.c.l.b16 %v10114
  %v12218 = vunpack.c.h.b16 %v10114
  %v12219 = vunpack.c.l.b16 %v10115
  %v12220 = vunpack.c.l.b16 %v10116
  %v12221 = vunpack.c.h.b16 %v10116
  %v12222 = vunpack.c.l.b16 %v10117
  %v12223 = vunpack.c.h.b16 %v10117
  %v12224 = vunpack.c.l.b16 %v10118
  %v12225 = vunpack.c.h.b16 %v10118
  %v12226 = vunpack.c.l.b16 %v10119
  %v12227 = vunpack.c.l.b16 %v10120
  %v12228 = vunpack.c.h.b16 %v10120
  %v12229 = vunpack.c.l.b16 %v10121
  %v12230 = vunpack.c.h.b16 %v10121
  %v12231 = vunpack.c.l.b16 %v10122
  %v12232 = vunpack.c.h.b16 %v10122
  %v12233 = vunpack.c.l.b16 %v10123
  %v12234 = vunpack.c.l.b16 %v10124
  %v12235 = vunpack.c.h.b16 %v10124
  %v12236 = vunpack.c.l.b16 %v10125
  %v12237 = vunpack.c.h.b16 %v10125
  %v12238 = vunpack.c.l.b16 %v10126
  %v12239 = vunpack.c.h.b16 %v10126
  %v12240 = vunpack.c.l.b16 %v10127
  %v12241 = vunpack.c.l.b16 %v10128
  %v12242 = vunpack.c.h.b16 %v10128
  %v12243 = vunpack.c.l.b16 %v10129
  %v12244 = vunpack.c.h.b16 %v10129
  %v12245 = vunpack.c.l.b16 %v10130
  %v12246 = vunpack.c.h.b16 %v10130
  %v12247 = vunpack.c.l.b16 %v10131
  %v12248 = vunpack.c.l.b16 %v10132
  %v12249 = vunpack.c.h.b16 %v10132
  %v12250 = vunpack.c.l.b16 %v10133
  %v12251 = vunpack.c.h.b16 %v10133
  %v12252 = vunpack.c.l.b16 %v10134
  %v12253 = vunpack.c.h.b16 %v10134
  %v12254 = vunpack.c.l.b16 %v10135
  %v12255 = vunpack.c.l.b16 %v10136
  %v12256 = vunpack.c.h.b16 %v10136
  %v12257 = vunpack.c.l.b16 %v10137
  %v12258 = vunpack.c.h.b16 %v10137
  %v12259 = vunpack.c.l.b16 %v10138
  %v12260 = vunpack.c.h.b16 %v10138
  %v12261 = vunpack.c.l.b16 %v10139
  %v12262 = vunpack.c.l.b16 %v10140
  %v12263 = vunpack.c.h.b16 %v10140
  %v12264 = vunpack.c.l.b16 %v10141
  %v12265 = vunpack.c.h.b16 %v10141
  %v12266 = vunpack.c.l.b16 %v10142
  %v12267 = vunpack.c.h.b16 %v10142
  %v12268 = vunpack.c.l.b16 %v10143
  %v12269 = vunpack.c.l.b16 %v10144
  %v12270 = vunpack.c.h.b16 %v10144
  %v12271 = vunpack.c.l.b16 %v10145
  %v12272 = vunpack.c.h.b16 %v10145
  %v12273 = vunpack.c.l.b16 %v10146
  %v12274 = vunpack.c.h.b16 %v10146
  %v12275 = vunpack.c.l.b16 %v10147
  %v12276 = vunpack.c.l.b16 %v10148
  %v12277 = vunpack.c.h.b16 %v10148
  %v12278 = vunpack.c.l.b16 %v10149
  %v12279 = vunpack.c.h.b16 %v10149
  %v12280 = vunpack.c.l.b16 %v10150
  %v12281 = vunpack.c.h.b16 %v10150
  %v12282 = vunpack.c.l.b16 %v10151
  %v12283 = vunpack.c.l.b16 %v10152
  %v12284 = vunpack.c.h.b16 %v10152
  %v12285 = vunpack.c.l.b16 %v10153
  %v12286 = vunpack.c.h.b16 %v10153
  %v12287 = vunpack.c.l.b16 %v10154
  %v12288 = vunpack.c.h.b16 %v10154
  %v12289 = vunpack.c.l.b16 %v10155
  %v12290 = vunpack.c.l.b16 %v10156
  %v12291 = vunpack.c.h.b16 %v10156
  %v12292 = vunpack.c.l.b16 %v10157
  %v12293 = vunpack.c.h.b16 %v10157
  %v12294 = vunpack.c.l.b16 %v10158
  %v12295 = vunpack.c.h.b16 %v10158
  %v12296 = vunpack.c.l.b16 %v10159
  %v12297 = vunpack.c.l.b16 %v10160
  %v12298 = vunpack.c.h.b16 %v10160
  %v12299 = vunpack.c.l.b16 %v10161
  %v12300 = vunpack.c.h.b16 %v10161
  %v12301 = vunpack.c.l.b16 %v10162
  %v12302 = vunpack.c.h.b16 %v10162
  %v12303 = vunpack.c.l.b16 %v10163
  %v12304 = vunpack.c.l.b16 %v10164
  %v12305 = vunpack.c.h.b16 %v10164
  %v12306 = vunpack.c.l.b16 %v10165
  %v12307 = vunpack.c.h.b16 %v10165
  %v12308 = vunpack.c.l.b16 %v10166
  %v12309 = vunpack.c.h.b16 %v10166
  %v12310 = vunpack.c.l.b16 %v10167
  %v12311 = vunpack.c.l.b16 %v10168
  %v12312 = vunpack.c.h.b16 %v10168
  %v12313 = vunpack.c.l.b16 %v10169
  %v12314 = vunpack.c.h.b16 %v10169
  %v12315 = vunpack.c.l.b16 %v10170
  %v12316 = vunpack.c.h.b16 %v10170
  %v12317 = vunpack.c.l.b16 %v10171
  %v12318 = vunpack.c.l.b16 %v10172
  %v12319 = vunpack.c.h.b16 %v10172
  %v12320 = vunpack.c.l.b16 %v10173
  %v12321 = vunpack.c.h.b16 %v10173
  %v12322 = vunpack.c.l.b16 %v10174
  %v12323 = vunpack.c.h.b16 %v10174
  %v12324 = vunpack.c.l.b16 %v10175
  %v12325 = vunpack.c.l.b16 %v10176
  %v12326 = vunpack.c.h.b16 %v10176
  %v12327 = vunpack.c.l.b16 %v10177
  %v12328 = vunpack.c.h.b16 %v10177
  %v12329 = vunpack.c.l.b16 %v10178
  %v12330 = vunpack.c.h.b16 %v10178
  %v12331 = vunpack.c.l.b16 %v10179
  %v12332 = vunpack.c.l.b16 %v10180
  %v12333 = vunpack.c.h.b16 %v10180
  %v12334 = vunpack.c.l.b16 %v10181
  %v12335 = vunpack.c.h.b16 %v10181
  %v12336 = vunpack.c.l.b16 %v10182
  %v12337 = vunpack.c.h.b16 %v10182
  %v12338 = vunpack.c.l.b16 %v10183
  %v12339 = vunpack.c.l.b16 %v10184
  %v12340 = vunpack.c.h.b16 %v10184
  %v12341 = vunpack.c.l.b16 %v10185
  %v12342 = vunpack.c.h.b16 %v10185
  %v12343 = vunpack.c.l.b16 %v10186
  %v12344 = vunpack.c.h.b16 %v10186
  %v12345 = vunpack.c.l.b16 %v10187
  %v12346 = vunpack.c.l.b16 %v10188
  %v12347 = vunpack.c.h.b16 %v10188
  %v12348 = vunpack.c.l.b16 %v10189
  %v12349 = vunpack.c.h.b16 %v10189
  %v12350 = vunpack.c.l.b16 %v10190
  %v12351 = vunpack.c.h.b16 %v10190
  %v12352 = vunpack.c.l.b16 %v10191
  %v12353 = vunpack.c.l.b16 %v10192
  %v12354 = vunpack.c.h.b16 %v10192
  %v12355 = vunpack.c.l.b16 %v10193
  %v12356 = vunpack.c.h.b16 %v10193
  %v12357 = vunpack.c.l.b16 %v10194
  %v12358 = vunpack.c.h.b16 %v10194
  %v12359 = vunpack.c.l.b16 %v10195
  %v12360 = vunpack.c.l.b16 %v10196
  %v12361 = vunpack.c.h.b16 %v10196
  %v12362 = vunpack.c.l.b16 %v10197
  %v12363 = vunpack.c.h.b16 %v10197
  %v12364 = vunpack.c.l.b16 %v10198
  %v12365 = vunpack.c.h.b16 %v10198
  %v12366 = vunpack.c.l.b16 %v10199
  %v12367 = vunpack.c.l.b16 %v10200
  %v12368 = vunpack.c.h.b16 %v10200
  %v12369 = vunpack.c.l.b16 %v10201
  %v12370 = vunpack.c.h.b16 %v10201
  %v12371 = vunpack.c.l.b16 %v10202
  %v12372 = vunpack.c.h.b16 %v10202
  %v12373 = vunpack.c.l.b16 %v10203
  %v12374 = vunpack.c.l.b16 %v10204
  %v12375 = vunpack.c.h.b16 %v10204
  %v12376 = vunpack.c.l.b16 %v10205
  %v12377 = vunpack.c.h.b16 %v10205
  %v12378 = vunpack.c.l.b16 %v10206
  %v12379 = vunpack.c.h.b16 %v10206
  %v12380 = vunpack.c.l.b16 %v10207
  %v12381 = vunpack.c.l.b16 %v10208
  %v12382 = vunpack.c.h.b16 %v10208
  %v12383 = vunpack.c.l.b16 %v10209
  %v12384 = vunpack.c.h.b16 %v10209
  %v12385 = vunpack.c.l.b16 %v10210
  %v12386 = vunpack.c.h.b16 %v10210
  %v12387 = vunpack.c.l.b16 %v10211
  %v12388 = vunpack.c.l.b16 %v10212
  %v12389 = vunpack.c.h.b16 %v10212
  %v12390 = vunpack.c.l.b16 %v10213
  %v12391 = vunpack.c.h.b16 %v10213
  %v12392 = vunpack.c.l.b16 %v10214
  %v12393 = vunpack.c.h.b16 %v10214
  %v12394 = vunpack.c.l.b16 %v10215
  %v12395 = vunpack.c.l.b16 %v10216
  %v12396 = vunpack.c.h.b16 %v10216
  %v12397 = vunpack.c.l.b16 %v10217
  %v12398 = vunpack.c.h.b16 %v10217
  %v12399 = vunpack.c.l.b16 %v10218
  %v12400 = vunpack.c.h.b16 %v10218
  %v12401 = vunpack.c.l.b16 %v10219
  %v12402 = vunpack.c.l.b16 %v10220
  %v12403 = vunpack.c.h.b16 %v10220
  %v12404 = vunpack.c.l.b16 %v10221
  %v12405 = vunpack.c.h.b16 %v10221
  %v12406 = vunpack.c.l.b16 %v10222
  %v12407 = vunpack.c.h.b16 %v10222
  %v12408 = vunpack.c.l.b16 %v10223
  %v12409 = vunpack.c.l.b16 %v10224
  %v12410 = vunpack.c.h.b16 %v10224
  %v12411 = vunpack.c.l.b16 %v10225
  %v12412 = vunpack.c.h.b16 %v10225
  %v12413 = vunpack.c.l.b16 %v10226
  %v12414 = vunpack.c.h.b16 %v10226
  %v12415 = vunpack.c.l.b16 %v10227
  %v12416 = vunpack.c.l.b16 %v10228
  %v12417 = vunpack.c.h.b16 %v10228
  %v12418 = vunpack.c.l.b16 %v10229
  %v12419 = vunpack.c.h.b16 %v10229
  %v12420 = vunpack.c.l.b16 %v10230
  %v12421 = vunpack.c.h.b16 %v10230
  %v12422 = vunpack.c.l.b16 %v10231
  %v12423 = vunpack.c.l.b16 %v10232
  %v12424 = vunpack.c.h.b16 %v10232
  %v12425 = vunpack.c.l.b16 %v10233
  %v12426 = vunpack.c.h.b16 %v10233
  %v12427 = vunpack.c.l.b16 %v10234
  %v12428 = vunpack.c.h.b16 %v10234
  %v12429 = vunpack.c.l.b16 %v10235
  %v12430 = vunpack.c.l.b16 %v10236
  %v12431 = vunpack.c.h.b16 %v10236
  %v12432 = vunpack.c.l.b16 %v10237
  %v12433 = vunpack.c.h.b16 %v10237
  %v12434 = vunpack.c.l.b16 %v10238
  %v12435 = vunpack.c.h.b16 %v10238
  %v12436 = vunpack.c.l.b16 %v10239
  %v12437 = vunpack.c.l.b16 %v10240
  %v12438 = vunpack.c.h.b16 %v10240
  %v12439 = vunpack.c.l.b16 %v10241
  %v12440 = vunpack.c.h.b16 %v10241
  %v12441 = vunpack.c.l.b16 %v10242
  %v12442 = vunpack.c.h.b16 %v10242
  %v12443 = vunpack.c.l.b16 %v10243
  %v12444 = vunpack.c.l.b16 %v10244
  %v12445 = vunpack.c.h.b16 %v10244
  %v12446 = vunpack.c.l.b16 %v10245
  %v12447 = vunpack.c.h.b16 %v10245
  %v12448 = vunpack.c.l.b16 %v10246
  %v12449 = vunpack.c.h.b16 %v10246
  %v12450 = vunpack.c.l.b16 %v10247
  %v12451 = vunpack.c.l.b16 %v10248
  %v12452 = vunpack.c.h.b16 %v10248
  %v12453 = vunpack.c.l.b16 %v10249
  %v12454 = vunpack.c.h.b16 %v10249
  %v12455 = vunpack.c.l.b16 %v10250
  %v12456 = vunpack.c.h.b16 %v10250
  %v12457 = vunpack.c.l.b16 %v10251
  %v12458 = vunpack.c.l.b16 %v10252
  %v12459 = vunpack.c.h.b16 %v10252
  %v12460 = vunpack.c.l.b16 %v10253
  %v12461 = vunpack.c.h.b16 %v10253
  %v12462 = vunpack.c.l.b16 %v10254
  %v12463 = vunpack.c.h.b16 %v10254
  %v12464 = vunpack.c.l.b16 %v10255
  %v12465 = vunpack.c.l.b16 %v10256
  %v12466 = vunpack.c.h.b16 %v10256
  %v12467 = vunpack.c.l.b16 %v10257
  %v12468 = vunpack.c.h.b16 %v10257
  %v12469 = vunpack.c.l.b16 %v10258
  %v12470 = vunpack.c.h.b16 %v10258
  %v12471 = vunpack.c.l.b16 %v10259
  %v12472 = vunpack.c.l.b16 %v10260
  %v12473 = vunpack.c.h.b16 %v10260
  %v12474 = vunpack.c.l.b16 %v10261
  %v12475 = vunpack.c.h.b16 %v10261
  %v12476 = vunpack.c.l.b16 %v10262
  %v12477 = vunpack.c.h.b16 %v10262
  %v12478 = vunpack.c.l.b16 %v10263
  %v12479 = vunpack.c.l.b16 %v10264
  %v12480 = vunpack.c.h.b16 %v10264
  %v12481 = vunpack.c.l.b16 %v10265
  %v12482 = vunpack.c.h.b16 %v10265
  %v12483 = vunpack.c.l.b16 %v10266
  %v12484 = vunpack.c.h.b16 %v10266
  %v12485 = vunpack.c.l.b16 %v10267
  %v12486 = vunpack.c.l.b16 %v10268
  %v12487 = vunpack.c.h.b16 %v10268
  %v12488 = vunpack.c.l.b16 %v10269
  %v12489 = vunpack.c.h.b16 %v10269
  %v12490 = vunpack.c.l.b16 %v10270
  %v12491 = vunpack.c.h.b16 %v10270
  %v12492 = vunpack.c.l.b16 %v10271
  %v12493 = vunpack.c.l.b16 %v10272
  %v12494 = vunpack.c.h.b16 %v10272
  %v12495 = vunpack.c.l.b16 %v10273
  %v12496 = vunpack.c.h.b16 %v10273
  %v12497 = vunpack.c.l.b16 %v10274
  %v12498 = vunpack.c.h.b16 %v10274
  %v12499 = vunpack.c.l.b16 %v10275
  %v12500 = vunpack.c.l.b16 %v10276
  %v12501 = vunpack.c.h.b16 %v10276
  %v12502 = vunpack.c.l.b16 %v10277
  %v12503 = vunpack.c.h.b16 %v10277
  %v12504 = vunpack.c.l.b16 %v10278
  %v12505 = vunpack.c.h.b16 %v10278
  %v12506 = vunpack.c.l.b16 %v10279
  %v12507 = vunpack.c.l.b16 %v10280
  %v12508 = vunpack.c.h.b16 %v10280
  %v12509 = vunpack.c.l.b16 %v10281
  %v12510 = vunpack.c.h.b16 %v10281
  %v12511 = vunpack.c.l.b16 %v10282
  %v12512 = vunpack.c.h.b16 %v10282
  %v12513 = vunpack.c.l.b16 %v10283
  %v12514 = vunpack.c.l.b16 %v10284
  %v12515 = vunpack.c.h.b16 %v10284
  %v12516 = vunpack.c.l.b16 %v10285
  %v12517 = vunpack.c.h.b16 %v10285
  %v12518 = vunpack.c.l.b16 %v10286
  %v12519 = vunpack.c.h.b16 %v10286
  %v12520 = vunpack.c.l.b16 %v10287
  %v12521 = vunpack.c.l.b16 %v10288
  %v12522 = vunpack.c.h.b16 %v10288
  %v12523 = vunpack.c.l.b16 %v10289
  %v12524 = vunpack.c.h.b16 %v10289
  %v12525 = vunpack.c.l.b16 %v10290
  %v12526 = vunpack.c.h.b16 %v10290
  %v12527 = vunpack.c.l.b16 %v10291
  %v12528 = vunpack.c.l.b16 %v10292
  %v12529 = vunpack.c.h.b16 %v10292
  %v12530 = vunpack.c.l.b16 %v10293
  %v12531 = vunpack.c.h.b16 %v10293
  %v12532 = vunpack.c.l.b16 %v10294
  %v12533 = vunpack.c.h.b16 %v10294
  %v12534 = vunpack.c.l.b16 %v10295
  %v12535 = vunpack.c.l.b16 %v10296
  %v12536 = vunpack.c.h.b16 %v10296
  %v12537 = vunpack.c.l.b16 %v10297
  %v12538 = vunpack.c.h.b16 %v10297
  %v12539 = vunpack.c.l.b16 %v10298
  %v12540 = vunpack.c.h.b16 %v10298
  %v12541 = vunpack.c.l.b16 %v10299
  %v12542 = vunpack.c.l.b16 %v10300
  %v12543 = vunpack.c.h.b16 %v10300
  %v12544 = vunpack.c.l.b16 %v10301
  %v12545 = vunpack.c.h.b16 %v10301
  %v12546 = vunpack.c.l.b16 %v10302
  %v12547 = vunpack.c.h.b16 %v10302
  %v12548 = vunpack.c.l.b16 %v10303
  %v12549 = vunpack.c.l.b16 %v10304
  %v12550 = vunpack.c.h.b16 %v10304
  %v12551 = vunpack.c.l.b16 %v10305
  %v12552 = vunpack.c.h.b16 %v10305
  %v12553 = vunpack.c.l.b16 %v10306
  %v12554 = vunpack.c.h.b16 %v10306
  %v12555 = vunpack.c.l.b16 %v10307
  %v12556 = vunpack.c.l.b16 %v10308
  %v12557 = vunpack.c.h.b16 %v10308
  %v12558 = vunpack.c.l.b16 %v10309
  %v12559 = vunpack.c.h.b16 %v10309
  %v12560 = vunpack.c.l.b16 %v10310
  %v12561 = vunpack.c.h.b16 %v10310
  %v12562 = vunpack.c.l.b16 %v10311
  %v12563 = vunpack.c.l.b16 %v10312
  %v12564 = vunpack.c.h.b16 %v10312
  %v12565 = vunpack.c.l.b16 %v10313
  %v12566 = vunpack.c.h.b16 %v10313
  %v12567 = vunpack.c.l.b16 %v10314
  %v12568 = vunpack.c.h.b16 %v10314
  %v12569 = vunpack.c.l.b16 %v10315
  %v12570 = vunpack.c.l.b16 %v10316
  %v12571 = vunpack.c.h.b16 %v10316
  %v12572 = vunpack.c.l.b16 %v10317
  %v12573 = vunpack.c.h.b16 %v10317
  %v12574 = vunpack.c.l.b16 %v10318
  %v12575 = vunpack.c.h.b16 %v10318
  %v12576 = vunpack.c.l.b16 %v10319
  %v12577 = vunpack.c.l.b16 %v10320
  %v12578 = vunpack.c.h.b16 %v10320
  %v12579 = vunpack.c.l.b16 %v10321
  %v12580 = vunpack.c.h.b16 %v10321
  %v12581 = vunpack.c.l.b16 %v10322
  %v12582 = vunpack.c.h.b16 %v10322
  %v12583 = vunpack.c.l.b16 %v10323
  %v12584 = vunpack.c.l.b16 %v10324
  %v12585 = vunpack.c.h.b16 %v10324
  %v12586 = vunpack.c.l.b16 %v10325
  %v12587 = vunpack.c.h.b16 %v10325
  %v12588 = vunpack.c.l.b16 %v10326
  %v12589 = vunpack.c.h.b16 %v10326
  %v12590 = vunpack.c.l.b16 %v10327
  %v12591 = vunpack.c.l.b16 %v10328
  %v12592 = vunpack.c.h.b16 %v10328
  %v12593 = vunpack.c.l.b16 %v10329
  %v12594 = vunpack.c.h.b16 %v10329
  %v12595 = vunpack.c.l.b16 %v10330
  %v12596 = vunpack.c.h.b16 %v10330
  %v12597 = vunpack.c.l.b16 %v10331
  %v12598 = vunpack.c.l.b16 %v10332
  %v12599 = vunpack.c.h.b16 %v10332
  %v12600 = vunpack.c.l.b16 %v10333
  %v12601 = vunpack.c.h.b16 %v10333
  %v12602 = vunpack.c.l.b16 %v10334
  %v12603 = vunpack.c.h.b16 %v10334
  %v12604 = vunpack.c.l.b16 %v10335
  %v12605 = vunpack.c.l.b16 %v10336
  %v12606 = vunpack.c.h.b16 %v10336
  %v12607 = vunpack.c.l.b16 %v10337
  %v12608 = vunpack.c.h.b16 %v10337
  %v12609 = vunpack.c.l.b16 %v10338
  %v12610 = vunpack.c.h.b16 %v10338
  %v12611 = vunpack.c.l.b16 %v10339
  %v12612 = vunpack.c.l.b16 %v10340
  %v12613 = vunpack.c.h.b16 %v10340
  %v12614 = vunpack.c.l.b16 %v10341
  %v12615 = vunpack.c.h.b16 %v10341
  %v12616 = vunpack.c.l.b16 %v10342
  %v12617 = vunpack.c.h.b16 %v10342
  %v12618 = vunpack.c.l.b16 %v10343
  %v12619 = vunpack.c.l.b16 %v10344
  %v12620 = vunpack.c.h.b16 %v10344
  %v12621 = vunpack.c.l.b16 %v10345
  %v12622 = vunpack.c.h.b16 %v10345
  %v12623 = vunpack.c.l.b16 %v10346
  %v12624 = vunpack.c.h.b16 %v10346
  %v12625 = vunpack.c.l.b16 %v10347
  %v12626 = vunpack.c.l.b16 %v10348
  %v12627 = vunpack.c.h.b16 %v10348
  %v12628 = vunpack.c.l.b16 %v10349
  %v12629 = vunpack.c.h.b16 %v10349
  %v12630 = vunpack.c.l.b16 %v10350
  %v12631 = vunpack.c.h.b16 %v10350
  %v12632 = vunpack.c.l.b16 %v10351
  %v12633 = vunpack.c.l.b16 %v10352
  %v12634 = vunpack.c.h.b16 %v10352
  %v12635 = vunpack.c.l.b16 %v10353
  %v12636 = vunpack.c.h.b16 %v10353
  %v12637 = vunpack.c.l.b16 %v10354
  %v12638 = vunpack.c.h.b16 %v10354
  %v12639 = vunpack.c.l.b16 %v10355
  %v12640 = vunpack.c.l.b16 %v10356
  %v12641 = vunpack.c.h.b16 %v10356
  %v12642 = vunpack.c.l.b16 %v10357
  %v12643 = vunpack.c.h.b16 %v10357
  %v12644 = vunpack.c.l.b16 %v10358
  %v12645 = vunpack.c.h.b16 %v10358
  %v12646 = vunpack.c.l.b16 %v10359
  %v12647 = vunpack.c.l.b16 %v10360
  %v12648 = vunpack.c.h.b16 %v10360
  %v12649 = vunpack.c.l.b16 %v10361
  %v12650 = vunpack.c.h.b16 %v10361
  %v12651 = vunpack.c.l.b16 %v10362
  %v12652 = vunpack.c.h.b16 %v10362
  %v12653 = vunpack.c.l.b16 %v10363
  %v12654 = vunpack.c.l.b16 %v10364
  %v12655 = vunpack.c.h.b16 %v10364
  %v12656 = vunpack.c.l.b16 %v10365
  %v12657 = vunpack.c.h.b16 %v10365
  %v12658 = vunpack.c.l.b16 %v10366
  %v12659 = vunpack.c.h.b16 %v10366
  %v12660 = vunpack.c.l.b16 %v10367
  %v12661 = vunpack.c.l.b16 %v10368
  %v12662 = vunpack.c.h.b16 %v10368
  %v12663 = vunpack.c.l.b16 %v10369
  %v12664 = vunpack.c.h.b16 %v10369
  %v12665 = vunpack.c.l.b16 %v10370
  %v12666 = vunpack.c.h.b16 %v10370
  %v12667 = vunpack.c.l.b16 %v10371
  %v12668 = vunpack.c.l.b16 %v10372
  %v12669 = vunpack.c.h.b16 %v10372
  %v12670 = vunpack.c.l.b16 %v10373
  %v12671 = vunpack.c.h.b16 %v10373
  %v12672 = vunpack.c.l.b16 %v10374
  %v12673 = vunpack.c.h.b16 %v10374
  %v12674 = vunpack.c.l.b16 %v10375
  %v12675 = vunpack.c.l.b16 %v10376
  %v12676 = vunpack.c.h.b16 %v10376
  %v12677 = vunpack.c.l.b16 %v10377
  %v12678 = vunpack.c.h.b16 %v10377
  %v12679 = vunpack.c.l.b16 %v10378
  %v12680 = vunpack.c.h.b16 %v10378
  %v12681 = vunpack.c.l.b16 %v10379
  %v12682 = vunpack.c.l.b16 %v10380
  %v12683 = vunpack.c.h.b16 %v10380
  %v12684 = vunpack.c.l.b16 %v10381
  %v12685 = vunpack.c.h.b16 %v10381
  %v12686 = vunpack.c.l.b16 %v10382
  %v12687 = vunpack.c.h.b16 %v10382
  %v12688 = vunpack.c.l.b16 %v10383
  %v12689 = vunpack.c.l.b16 %v10384
  %v12690 = vunpack.c.h.b16 %v10384
  %v12691 = vunpack.c.l.b16 %v10385
  %v12692 = vunpack.c.h.b16 %v10385
  %v12693 = vunpack.c.l.b16 %v10386
  %v12694 = vunpack.c.h.b16 %v10386
  %v12695 = vunpack.c.l.b16 %v10387
  %v12696 = vunpack.c.l.b16 %v10388
  %v12697 = vunpack.c.h.b16 %v10388
  %v12698 = vunpack.c.l.b16 %v10389
  %v12699 = vunpack.c.h.b16 %v10389
  %v12700 = vunpack.c.l.b16 %v10390
  %v12701 = vunpack.c.h.b16 %v10390
  %v12702 = vunpack.c.l.b16 %v10391
  %v12703 = vunpack.c.l.b16 %v10392
  %v12704 = vunpack.c.h.b16 %v10392
  %v12705 = vunpack.c.l.b16 %v10393
  %v12706 = vunpack.c.h.b16 %v10393
  %v12707 = vunpack.c.l.b16 %v10394
  %v12708 = vunpack.c.h.b16 %v10394
  %v12709 = vunpack.c.l.b16 %v10395
  %v12710 = vunpack.c.l.b16 %v10396
  %v12711 = vunpack.c.h.b16 %v10396
  %v12712 = vunpack.c.l.b16 %v10397
  %v12713 = vunpack.c.h.b16 %v10397
  %v12714 = vunpack.c.l.b16 %v10398
  %v12715 = vunpack.c.h.b16 %v10398
  %v12716 = vunpack.c.l.b16 %v10399
  %v12717 = vunpack.c.l.b16 %v10400
  %v12718 = vunpack.c.h.b16 %v10400
  %v12719 = vunpack.c.l.b16 %v10401
  %v12720 = vunpack.c.h.b16 %v10401
  %v12721 = vunpack.c.l.b16 %v10402
  %v12722 = vunpack.c.h.b16 %v10402
  %v12723 = vunpack.c.l.b16 %v10403
  %v12724 = vunpack.c.l.b16 %v10404
  %v12725 = vunpack.c.h.b16 %v10404
  %v12726 = vunpack.c.l.b16 %v10405
  %v12727 = vunpack.c.h.b16 %v10405
  %v12728 = vunpack.c.l.b16 %v10406
  %v12729 = vunpack.c.h.b16 %v10406
  %v12730 = vunpack.c.l.b16 %v10407
  %v12731 = vunpack.c.l.b16 %v10408
  %v12732 = vunpack.c.h.b16 %v10408
  %v12733 = vunpack.c.l.b16 %v10409
  %v12734 = vunpack.c.h.b16 %v10409
  %v12735 = vunpack.c.l.b16 %v10410
  %v12736 = vunpack.c.h.b16 %v10410
  %v12737 = vunpack.c.l.b16 %v10411
  %v12738 = vunpack.c.l.b16 %v10412
  %v12739 = vunpack.c.h.b16 %v10412
  %v12740 = vunpack.c.l.b16 %v10413
  %v12741 = vunpack.c.h.b16 %v10413
  %v12742 = vunpack.c.l.b16 %v10414
  %v12743 = vunpack.c.h.b16 %v10414
  %v12744 = vunpack.c.l.b16 %v10415
  %v12745 = vunpack.c.l.b16 %v10416
  %v12746 = vunpack.c.h.b16 %v10416
  %v12747 = vunpack.c.l.b16 %v10417
  %v12748 = vunpack.c.h.b16 %v10417
  %v12749 = vunpack.c.l.b16 %v10418
  %v12750 = vunpack.c.h.b16 %v10418
  %v12751 = vunpack.c.l.b16 %v10419
  %v12752 = vunpack.c.l.b16 %v10420
  %v12753 = vunpack.c.h.b16 %v10420
  %v12754 = vunpack.c.l.b16 %v10421
  %v12755 = vunpack.c.h.b16 %v10421
  %v12756 = vunpack.c.l.b16 %v10422
  %v12757 = vunpack.c.h.b16 %v10422
  %v12758 = vunpack.c.l.b16 %v10423
  %v12759 = vunpack.c.l.b16 %v10424
  %v12760 = vunpack.c.h.b16 %v10424
  %v12761 = vunpack.c.l.b16 %v10425
  %v12762 = vunpack.c.h.b16 %v10425
  %v12763 = vunpack.c.l.b16 %v10426
  %v12764 = vunpack.c.h.b16 %v10426
  %v12765 = vunpack.c.l.b16 %v10427
  %v12766 = vunpack.c.l.b16 %v10428
  %v12767 = vunpack.c.h.b16 %v10428
  %v12768 = vunpack.c.l.b16 %v10429
  %v12769 = vunpack.c.h.b16 %v10429
  %v12770 = vunpack.c.l.b16 %v10430
  %v12771 = vunpack.c.h.b16 %v10430
  %v12772 = vunpack.c.l.b16 %v10431
  %v12773 = vunpack.c.l.b16 %v10432
  %v12774 = vunpack.c.h.b16 %v10432
  %v12775 = vunpack.c.l.b16 %v10433
  %v12776 = vunpack.c.h.b16 %v10433
  %v12777 = vunpack.c.l.b16 %v10434
  %v12778 = vunpack.c.h.b16 %v10434
  %v12779 = vunpack.c.l.b16 %v10435
  %v12780 = vunpack.c.l.b16 %v10436
  %v12781 = vunpack.c.h.b16 %v10436
  %v12782 = vunpack.c.l.b16 %v10437
  %v12783 = vunpack.c.h.b16 %v10437
  %v12784 = vunpack.c.l.b16 %v10438
  %v12785 = vunpack.c.h.b16 %v10438
  %v12786 = vunpack.c.l.b16 %v10439
  %v12787 = vunpack.c.l.b16 %v10440
  %v12788 = vunpack.c.h.b16 %v10440
  %v12789 = vunpack.c.l.b16 %v10441
  %v12790 = vunpack.c.h.b16 %v10441
  %v12791 = vunpack.c.l.b16 %v10442
  %v12792 = vunpack.c.h.b16 %v10442
  %v12793 = vunpack.c.l.b16 %v10443
  %v12794 = vunpack.c.l.b16 %v10444
  %v12795 = vunpack.c.h.b16 %v10444
  %v12796 = vunpack.c.l.b16 %v10445
  %v12797 = vunpack.c.h.b16 %v10445
  %v12798 = vunpack.c.l.b16 %v10446
  %v12799 = vunpack.c.h.b16 %v10446
  %v12800 = vunpack.c.l.b16 %v10447
  %v12801 = vunpack.c.l.b16 %v10448
  %v12802 = vunpack.c.h.b16 %v10448
  %v12803 = vunpack.c.l.b16 %v10449
  %v12804 = vunpack.c.h.b16 %v10449
  %v12805 = vunpack.c.l.b16 %v10450
  %v12806 = vunpack.c.h.b16 %v10450
  %v12807 = vunpack.c.l.b16 %v10451
  %v12808 = vunpack.c.l.b16 %v10452
  %v12809 = vunpack.c.h.b16 %v10452
  %v12810 = vunpack.c.l.b16 %v10453
  %v12811 = vunpack.c.h.b16 %v10453
  %v12812 = vunpack.c.l.b16 %v10454
  %v12813 = vunpack.c.h.b16 %v10454
  %v12814 = vunpack.c.l.b16 %v10455
  %v12815 = vunpack.c.l.b16 %v10456
  %v12816 = vunpack.c.h.b16 %v10456
  %v12817 = vunpack.c.l.b16 %v10457
  %v12818 = vunpack.c.h.b16 %v10457
  %v12819 = vunpack.c.l.b16 %v10458
  %v12820 = vunpack.c.h.b16 %v10458
  %v12821 = vunpack.c.l.b16 %v10459
  %v12822 = vunpack.c.l.b16 %v10460
  %v12823 = vunpack.c.h.b16 %v10460
  %v12824 = vunpack.c.l.b16 %v10461
  %v12825 = vunpack.c.h.b16 %v10461
  %v12826 = vunpack.c.l.b16 %v10462
  %v12827 = vunpack.c.h.b16 %v10462
  %v12828 = vunpack.c.l.b16 %v10463
  %v12829 = vunpack.c.l.b16 %v10464
  %v12830 = vunpack.c.h.b16 %v10464
  %v12831 = vunpack.c.l.b16 %v10465
  %v12832 = vunpack.c.h.b16 %v10465
  %v12833 = vunpack.c.l.b16 %v10466
  %v12834 = vunpack.c.h.b16 %v10466
  %v12835 = vunpack.c.l.b16 %v10467
  %v12836 = vunpack.c.l.b16 %v10468
  %v12837 = vunpack.c.h.b16 %v10468
  %v12838 = vunpack.c.l.b16 %v10469
  %v12839 = vunpack.c.h.b16 %v10469
  %v12840 = vunpack.c.l.b16 %v10470
  %v12841 = vunpack.c.h.b16 %v10470
  %v12842 = vunpack.c.l.b16 %v10471
  %v12843 = vunpack.c.l.b16 %v10472
  %v12844 = vunpack.c.h.b16 %v10472
  %v12845 = vunpack.c.l.b16 %v10473
  %v12846 = vunpack.c.h.b16 %v10473
  %v12847 = vunpack.c.l.b16 %v10474
  %v12848 = vunpack.c.h.b16 %v10474
  %v12849 = vunpack.c.l.b16 %v10475
  %v12850 = vunpack.c.l.b16 %v10476
  %v12851 = vunpack.c.h.b16 %v10476
  %v12852 = vunpack.c.l.b16 %v10477
  %v12853 = vunpack.c.h.b16 %v10477
  %v12854 = vunpack.c.l.b16 %v10478
  %v12855 = vunpack.c.h.b16 %v10478
  %v12856 = vunpack.c.l.b16 %v10479
  %v12857 = vunpack.c.l.b16 %v10480
  %v12858 = vunpack.c.h.b16 %v10480
  %v12859 = vunpack.c.l.b16 %v10481
  %v12860 = vunpack.c.h.b16 %v10481
  %v12861 = vunpack.c.l.b16 %v10482
  %v12862 = vunpack.c.h.b16 %v10482
  %v12863 = vunpack.c.l.b16 %v10483
  %v12864 = vunpack.c.l.b16 %v10484
  %v12865 = vunpack.c.h.b16 %v10484
  %v12866 = vunpack.c.l.b16 %v10485
  %v12867 = vunpack.c.h.b16 %v10485
  %v12868 = vunpack.c.l.b16 %v10486
  %v12869 = vunpack.c.h.b16 %v10486
  %v12870 = vunpack.c.l.b16 %v10487
  %v12871 = vunpack.c.l.b16 %v10488
  %v12872 = vunpack.c.h.b16 %v10488
  %v12873 = vunpack.c.l.b16 %v10489
  %v12874 = vunpack.c.h.b16 %v10489
  %v12875 = vunpack.c.l.b16 %v10490
  %v12876 = vunpack.c.h.b16 %v10490
  %v12877 = vunpack.c.l.b16 %v10491
  %v12878 = vunpack.c.l.b16 %v10492
  %v12879 = vunpack.c.h.b16 %v10492
  %v12880 = vunpack.c.l.b16 %v10493
  %v12881 = vunpack.c.h.b16 %v10493
  %v12882 = vunpack.c.l.b16 %v10494
  %v12883 = vunpack.c.h.b16 %v10494
  %v12884 = vunpack.c.l.b16 %v10495
  %v12885 = vunpack.c.l.b16 %v10496
  %v12886 = vunpack.c.h.b16 %v10496
  %v12887 = vunpack.c.l.b16 %v10497
  %v12888 = vunpack.c.h.b16 %v10497
  %v12889 = vunpack.c.l.b16 %v10498
  %v12890 = vunpack.c.h.b16 %v10498
  %v12891 = vunpack.c.l.b16 %v10499
  %v12892 = vunpack.c.l.b16 %v10500
  %v12893 = vunpack.c.h.b16 %v10500
  %v12894 = vunpack.c.l.b16 %v10501
  %v12895 = vunpack.c.h.b16 %v10501
  %v12896 = vunpack.c.l.b16 %v10502
  %v12897 = vunpack.c.h.b16 %v10502
  %v12898 = vunpack.c.l.b16 %v10503
  %v12899 = vunpack.c.l.b16 %v10504
  %v12900 = vunpack.c.h.b16 %v10504
  %v12901 = vunpack.c.l.b16 %v10505
  %v12902 = vunpack.c.h.b16 %v10505
  %v12903 = vunpack.c.l.b16 %v10506
  %v12904 = vunpack.c.h.b16 %v10506
  %v12905 = vunpack.c.l.b16 %v10507
  %v12906 = vunpack.c.l.b16 %v10508
  %v12907 = vunpack.c.h.b16 %v10508
  %v12908 = vunpack.c.l.b16 %v10509
  %v12909 = vunpack.c.h.b16 %v10509
  %v12910 = vunpack.c.l.b16 %v10510
  %v12911 = vunpack.c.h.b16 %v10510
  %v12912 = vunpack.c.l.b16 %v10511
  %v12913 = vunpack.c.l.b16 %v10512
  %v12914 = vunpack.c.h.b16 %v10512
  %v12915 = vunpack.c.l.b16 %v10513
  %v12916 = vunpack.c.h.b16 %v10513
  %v12917 = vunpack.c.l.b16 %v10514
  %v12918 = vunpack.c.h.b16 %v10514
  %v12919 = vunpack.c.l.b16 %v10515
  %v12920 = vunpack.c.l.b16 %v10516
  %v12921 = vunpack.c.h.b16 %v10516
  %v12922 = vunpack.c.l.b16 %v10517
  %v12923 = vunpack.c.h.b16 %v10517
  %v12924 = vunpack.c.l.b16 %v10518
  %v12925 = vunpack.c.h.b16 %v10518
  %v12926 = vunpack.c.l.b16 %v10519
  %v12927 = vunpack.c.l.b16 %v10520
  %v12928 = vunpack.c.h.b16 %v10520
  %v12929 = vunpack.c.l.b16 %v10521
  %v12930 = vunpack.c.h.b16 %v10521
  %v12931 = vunpack.c.l.b16 %v10522
  %v12932 = vunpack.c.h.b16 %v10522
  %v12933 = vunpack.c.l.b16 %v10523
  %v12934 = vunpack.c.l.b16 %v10524
  %v12935 = vunpack.c.h.b16 %v10524
  %v12936 = vunpack.c.l.b16 %v10525
  %v12937 = vunpack.c.h.b16 %v10525
  %v12938 = vunpack.c.l.b16 %v10526
  %v12939 = vunpack.c.h.b16 %v10526
  %v12940 = vunpack.c.l.b16 %v10527
  %v12941 = vunpack.c.l.b16 %v10528
  %v12942 = vunpack.c.h.b16 %v10528
  %v12943 = vunpack.c.l.b16 %v10529
  %v12944 = vunpack.c.h.b16 %v10529
  %v12945 = vunpack.c.l.b16 %v10530
  %v12946 = vunpack.c.h.b16 %v10530
  %v12947 = vunpack.c.l.b16 %v10531
  %v12948 = vunpack.c.l.b16 %v10532
  %v12949 = vunpack.c.h.b16 %v10532
  %v12950 = vunpack.c.l.b16 %v10533
  %v12951 = vunpack.c.h.b16 %v10533
  %v12952 = vunpack.c.l.b16 %v10534
  %v12953 = vunpack.c.h.b16 %v10534
  %v12954 = vunpack.c.l.b16 %v10535
  %v12955 = vunpack.c.l.b16 %v10536
  %v12956 = vunpack.c.h.b16 %v10536
  %v12957 = vunpack.c.l.b16 %v10537
  %v12958 = vunpack.c.h.b16 %v10537
  %v12959 = vunpack.c.l.b16 %v10538
  %v12960 = vunpack.c.h.b16 %v10538
  %v12961 = vunpack.c.l.b16 %v10539
  %v12962 = vunpack.c.l.b16 %v10540
  %v12963 = vunpack.c.h.b16 %v10540
  %v12964 = vunpack.c.l.b16 %v10541
  %v12965 = vunpack.c.h.b16 %v10541
  %v12966 = vunpack.c.l.b16 %v10542
  %v12967 = vunpack.c.h.b16 %v10542
  %v12968 = vunpack.c.l.b16 %v10543
  %v12969 = vunpack.c.l.b16 %v10544
  %v12970 = vunpack.c.h.b16 %v10544
  %v12971 = vunpack.c.l.b16 %v10545
  %v12972 = vunpack.c.h.b16 %v10545
  %v12973 = vunpack.c.l.b16 %v10546
  %v12974 = vunpack.c.h.b16 %v10546
  %v12975 = vunpack.c.l.b16 %v10547
  %v12976 = vunpack.c.l.b16 %v10548
  %v12977 = vunpack.c.h.b16 %v10548
  %v12978 = vunpack.c.l.b16 %v10549
  %v12979 = vunpack.c.h.b16 %v10549
  %v12980 = vunpack.c.l.b16 %v10550
  %v12981 = vunpack.c.h.b16 %v10550
  %v12982 = vunpack.c.l.b16 %v10551
  %v12983 = vunpack.c.l.b16 %v10552
  %v12984 = vunpack.c.h.b16 %v10552
  %v12985 = vunpack.c.l.b16 %v10553
  %v12986 = vunpack.c.h.b16 %v10553
  %v12987 = vunpack.c.l.b16 %v10554
  %v12988 = vunpack.c.h.b16 %v10554
  %v12989 = vunpack.c.l.b16 %v10555
  %v12990 = vunpack.c.l.b16 %v10556
  %v12991 = vunpack.c.h.b16 %v10556
  %v12992 = vunpack.c.l.b16 %v10557
  %v12993 = vunpack.c.h.b16 %v10557
  %v12994 = vunpack.c.l.b16 %v10558
  %v12995 = vunpack.c.h.b16 %v10558
  %v12996 = vunpack.c.l.b16 %v10559
  %v12997 = vunpack.c.l.b16 %v10560
  %v12998 = vunpack.c.h.b16 %v10560
  %v12999 = vunpack.c.l.b16 %v10561
  %v13000 = vunpack.c.h.b16 %v10561
  %v13001 = vunpack.c.l.b16 %v10562
  %v13002 = vunpack.c.h.b16 %v10562
  %v13003 = vunpack.c.l.b16 %v10563
  %v13004 = vunpack.c.l.b16 %v10564
  %v13005 = vunpack.c.h.b16 %v10564
  %v13006 = vunpack.c.l.b16 %v10565
  %v13007 = vunpack.c.h.b16 %v10565
  %v13008 = vunpack.c.l.b16 %v10566
  %v13009 = vunpack.c.h.b16 %v10566
  %v13010 = vunpack.c.l.b16 %v10567
  %v13011 = vunpack.c.l.b16 %v10568
  %v13012 = vunpack.c.h.b16 %v10568
  %v13013 = vunpack.c.l.b16 %v10569
  %v13014 = vunpack.c.h.b16 %v10569
  %v13015 = vunpack.c.l.b16 %v10570
  %v13016 = vunpack.c.h.b16 %v10570
  %v13017 = vunpack.c.l.b16 %v10571
  %v13018 = vunpack.c.l.b16 %v10572
  %v13019 = vunpack.c.h.b16 %v10572
  %v13020 = vunpack.c.l.b16 %v10573
  %v13021 = vunpack.c.h.b16 %v10573
  %v13022 = vunpack.c.l.b16 %v10574
  %v13023 = vunpack.c.h.b16 %v10574
  %v13024 = vunpack.c.l.b16 %v10575
  %v13025 = vunpack.c.l.b16 %v10576
  %v13026 = vunpack.c.h.b16 %v10576
  %v13027 = vunpack.c.l.b16 %v10577
  %v13028 = vunpack.c.h.b16 %v10577
  %v13029 = vunpack.c.l.b16 %v10578
  %v13030 = vunpack.c.h.b16 %v10578
  %v13031 = vunpack.c.l.b16 %v10579
  %v13032 = vunpack.c.l.b16 %v10580
  %v13033 = vunpack.c.h.b16 %v10580
  %v13034 = vunpack.c.l.b16 %v10581
  %v13035 = vunpack.c.h.b16 %v10581
  %v13036 = vunpack.c.l.b16 %v10582
  %v13037 = vunpack.c.h.b16 %v10582
  %v13038 = vunpack.c.l.b16 %v10583
  %v13039 = vunpack.c.l.b16 %v10584
  %v13040 = vunpack.c.h.b16 %v10584
  %v13041 = vunpack.c.l.b16 %v10585
  %v13042 = vunpack.c.h.b16 %v10585
  %v13043 = vunpack.c.l.b16 %v10586
  %v13044 = vunpack.c.h.b16 %v10586
  %v13045 = vunpack.c.l.b16 %v10587
  %v13046 = vunpack.c.l.b16 %v10588
  %v13047 = vunpack.c.h.b16 %v10588
  %v13048 = vunpack.c.l.b16 %v10589
  %v13049 = vunpack.c.h.b16 %v10589
  %v13050 = vunpack.c.l.b16 %v10590
  %v13051 = vunpack.c.h.b16 %v10590
  %v13052 = vunpack.c.l.b16 %v10591
  %v13053 = vunpack.c.l.b16 %v10592
  %v13054 = vunpack.c.h.b16 %v10592
  %v13055 = vunpack.c.l.b16 %v10593
  %v13056 = vunpack.c.h.b16 %v10593
  %v13057 = vunpack.c.l.b16 %v10594
  %v13058 = vunpack.c.h.b16 %v10594
  %v13059 = vunpack.c.l.b16 %v10595
  %v13060 = vunpack.c.l.b16 %v10596
  %v13061 = vunpack.c.h.b16 %v10596
  %v13062 = vunpack.c.l.b16 %v10597
  %v13063 = vunpack.c.h.b16 %v10597
  %v13064 = vunpack.c.l.b16 %v10598
  %v13065 = vunpack.c.h.b16 %v10598
  %v13066 = vunpack.c.l.b16 %v10599
  %v13067 = vunpack.c.l.b16 %v10600
  %v13068 = vunpack.c.h.b16 %v10600
  %v13069 = vunpack.c.l.b16 %v10601
  %v13070 = vunpack.c.h.b16 %v10601
  %v13071 = vunpack.c.l.b16 %v10602
  %v13072 = vunpack.c.h.b16 %v10602
  %v13073 = vunpack.c.l.b16 %v10603
  %v13074 = vunpack.c.l.b16 %v10604
  %v13075 = vunpack.c.h.b16 %v10604
  %v13076 = vunpack.c.l.b16 %v10605
  %v13077 = vunpack.c.h.b16 %v10605
  %v13078 = vunpack.c.l.b16 %v10606
  %v13079 = vunpack.c.h.b16 %v10606
  %v13080 = vunpack.c.l.b16 %v10607
  %v13081 = vunpack.c.l.b16 %v10608
  %v13082 = vunpack.c.h.b16 %v10608
  %v13083 = vunpack.c.l.b16 %v10609
  %v13084 = vunpack.c.h.b16 %v10609
  %v13085 = vunpack.c.l.b16 %v10610
  %v13086 = vunpack.c.h.b16 %v10610
  %v13087 = vunpack.c.l.b16 %v10611
  %v13088 = vunpack.c.l.b16 %v10612
  %v13089 = vunpack.c.h.b16 %v10612
  %v13090 = vunpack.c.l.b16 %v10613
  %v13091 = vunpack.c.h.b16 %v10613
  %v13092 = vunpack.c.l.b16 %v10614
  %v13093 = vunpack.c.h.b16 %v10614
  %v13094 = vunpack.c.l.b16 %v10615
  %v13095 = vunpack.c.l.b16 %v10616
  %v13096 = vunpack.c.h.b16 %v10616
  %v13097 = vunpack.c.l.b16 %v10617
  %v13098 = vunpack.c.h.b16 %v10617
  %v13099 = vunpack.c.l.b16 %v10618
  %v13100 = vunpack.c.h.b16 %v10618
  %v13101 = vunpack.c.l.b16 %v10619
  %v13102 = vunpack.c.l.b16 %v10620
  %v13103 = vunpack.c.h.b16 %v10620
  %v13104 = vunpack.c.l.b16 %v10621
  %v13105 = vunpack.c.h.b16 %v10621
  %v13106 = vunpack.c.l.b16 %v10622
  %v13107 = vunpack.c.h.b16 %v10622
  %v13108 = vunpack.c.l.b16 %v10623
  %v13109 = vunpack.c.l.b16 %v10624
  %v13110 = vunpack.c.h.b16 %v10624
  %v13111 = vunpack.c.l.b16 %v10625
  %v13112 = vunpack.c.h.b16 %v10625
  %v13113 = vunpack.c.l.b16 %v10626
  %v13114 = vunpack.c.h.b16 %v10626
  %v13115 = vunpack.c.l.b16 %v10627
  %v13116 = vunpack.c.l.b16 %v10628
  %v13117 = vunpack.c.h.b16 %v10628
  %v13118 = vunpack.c.l.b16 %v10629
  %v13119 = vunpack.c.h.b16 %v10629
  %v13120 = vunpack.c.l.b16 %v10630
  %v13121 = vunpack.c.h.b16 %v10630
  %v13122 = vunpack.c.l.b16 %v10631
  %v13123 = vunpack.c.l.b16 %v10632
  %v13124 = vunpack.c.h.b16 %v10632
  %v13125 = vunpack.c.l.b16 %v10633
  %v13126 = vunpack.c.h.b16 %v10633
  %v13127 = vunpack.c.l.b16 %v10634
  %v13128 = vunpack.c.h.b16 %v10634
  %v13129 = vunpack.c.l.b16 %v10635
  %v13130 = vunpack.c.l.b16 %v10636
  %v13131 = vunpack.c.h.b16 %v10636
  %v13132 = vunpack.c.l.b16 %v10637
  %v13133 = vunpack.c.h.b16 %v10637
  %v13134 = vunpack.c.l.b16 %v10638
  %v13135 = vunpack.c.h.b16 %v10638
  %v13136 = vunpack.c.l.b16 %v10639
  %v13137 = vunpack.c.l.b16 %v10640
  %v13138 = vunpack.c.h.b16 %v10640
  %v13139 = vunpack.c.l.b16 %v10641
  %v13140 = vunpack.c.h.b16 %v10641
  %v13141 = vunpack.c.l.b16 %v10642
  %v13142 = vunpack.c.h.b16 %v10642
  %v13143 = vunpack.c.l.b16 %v10643
  %v13144 = vunpack.c.l.b16 %v10644
  %v13145 = vunpack.c.h.b16 %v10644
  %v13146 = vunpack.c.l.b16 %v10645
  %v13147 = vunpack.c.h.b16 %v10645
  %v13148 = vunpack.c.l.b16 %v10646
  %v13149 = vunpack.c.h.b16 %v10646
  %v13150 = vunpack.c.l.b16 %v10647
  %v13151 = vunpack.c.l.b16 %v10648
  %v13152 = vunpack.c.h.b16 %v10648
  %v13153 = vunpack.c.l.b16 %v10649
  %v13154 = vunpack.c.h.b16 %v10649
  %v13155 = vunpack.c.l.b16 %v10650
  %v13156 = vunpack.c.h.b16 %v10650
  %v13157 = vunpack.c.l.b16 %v10651
  %v13158 = vunpack.c.l.b16 %v10652
  %v13159 = vunpack.c.h.b16 %v10652
  %v13160 = vunpack.c.l.b16 %v10653
  %v13161 = vunpack.c.h.b16 %v10653
  %v13162 = vunpack.c.l.b16 %v10654
  %v13163 = vunpack.c.h.b16 %v10654
  %v13164 = vunpack.c.l.b16 %v10655
  %v13165 = vunpack.c.l.b16 %v10656
  %v13166 = vunpack.c.h.b16 %v10656
  %v13167 = vunpack.c.l.b16 %v10657
  %v13168 = vunpack.c.h.b16 %v10657
  %v13169 = vunpack.c.l.b16 %v10658
  %v13170 = vunpack.c.h.b16 %v10658
  %v13171 = vunpack.c.l.b16 %v10659
  %v13172 = vpack.c.b16 %v11604, %v11597
  %v13173 = vpack.c.b16 %v11605, %v11598
  %v13174 = vpack.c.b16 %v11606, %v11599
  %v13175 = vpack.c.b16 %v11607, %v11600
  %v13176 = vpack.c.b16 %v11608, %v11601
  %v13177 = vpack.c.b16 %v11609, %v11602
  %v13178 = vpack.c.b16 %v11610, %v11603
  %v13179 = vpack.c.b16 %v11618, %v11611
  %v13180 = vpack.c.b16 %v11619, %v11612
  %v13181 = vpack.c.b16 %v11620, %v11613
  %v13182 = vpack.c.b16 %v11621, %v11614
  %v13183 = vpack.c.b16 %v11622, %v11615
  %v13184 = vpack.c.b16 %v11623, %v11616
  %v13185 = vpack.c.b16 %v11624, %v11617
  %v13186 = vpack.c.b16 %v11632, %v11625
  %v13187 = vpack.c.b16 %v11633, %v11626
  %v13188 = vpack.c.b16 %v11634, %v11627
  %v13189 = vpack.c.b16 %v11635, %v11628
  %v13190 = vpack.c.b16 %v11636, %v11629
  %v13191 = vpack.c.b16 %v11637, %v11630
  %v13192 = vpack.c.b16 %v11638, %v11631
  %v13193 = vpack.c.b16 %v11646, %v11639
  %v13194 = vpack.c.b16 %v11647, %v11640
  %v13195 = vpack.c.b16 %v11648, %v11641
  %v13196 = vpack.c.b16 %v11649, %v11642
  %v13197 = vpack.c.b16 %v11650, %v11643
  %v13198 = vpack.c.b16 %v11651, %v11644
  %v13199 = vpack.c.b16 %v11652, %v11645
  %v13200 = vpack.c.b16 %v11660, %v11653
  %v13201 = vpack.c.b16 %v11661, %v11654
  %v13202 = vpack.c.b16 %v11662, %v11655
  %v13203 = vpack.c.b16 %v11663, %v11656
  %v13204 = vpack.c.b16 %v11664, %v11657
  %v13205 = vpack.c.b16 %v11665, %v11658
  %v13206 = vpack.c.b16 %v11666, %v11659
  %v13207 = vpack.c.b16 %v11674, %v11667
  %v13208 = vpack.c.b16 %v11675, %v11668
  %v13209 = vpack.c.b16 %v11676, %v11669
  %v13210 = vpack.c.b16 %v11677, %v11670
  %v13211 = vpack.c.b16 %v11678, %v11671
  %v13212 = vpack.c.b16 %v11679, %v11672
  %v13213 = vpack.c.b16 %v11680, %v11673
  %v13214 = vpack.c.b16 %v11688, %v11681
  %v13215 = vpack.c.b16 %v11689, %v11682
  %v13216 = vpack.c.b16 %v11690, %v11683
  %v13217 = vpack.c.b16 %v11691, %v11684
  %v13218 = vpack.c.b16 %v11692, %v11685
  %v13219 = vpack.c.b16 %v11693, %v11686
  %v13220 = vpack.c.b16 %v11694, %v11687
  %v13221 = vpack.c.b16 %v11702, %v11695
  %v13222 = vpack.c.b16 %v11703, %v11696
  %v13223 = vpack.c.b16 %v11704, %v11697
  %v13224 = vpack.c.b16 %v11705, %v11698
  %v13225 = vpack.c.b16 %v11706, %v11699
  %v13226 = vpack.c.b16 %v11707, %v11700
  %v13227 = vpack.c.b16 %v11708, %v11701
  %v13228 = vpack.c.b16 %v11716, %v11709
  %v13229 = vpack.c.b16 %v11717, %v11710
  %v13230 = vpack.c.b16 %v11718, %v11711
  %v13231 = vpack.c.b16 %v11719, %v11712
  %v13232 = vpack.c.b16 %v11720, %v11713
  %v13233 = vpack.c.b16 %v11721, %v11714
  %v13234 = vpack.c.b16 %v11722, %v11715
  %v13235 = vpack.c.b16 %v11730, %v11723
  %v13236 = vpack.c.b16 %v11731, %v11724
  %v13237 = vpack.c.b16 %v11732, %v11725
  %v13238 = vpack.c.b16 %v11733, %v11726
  %v13239 = vpack.c.b16 %v11734, %v11727
  %v13240 = vpack.c.b16 %v11735, %v11728
  %v13241 = vpack.c.b16 %v11736, %v11729
  %v13242 = vpack.c.b16 %v11744, %v11737
  %v13243 = vpack.c.b16 %v11745, %v11738
  %v13244 = vpack.c.b16 %v11746, %v11739
  %v13245 = vpack.c.b16 %v11747, %v11740
  %v13246 = vpack.c.b16 %v11748, %v11741
  %v13247 = vpack.c.b16 %v11749, %v11742
  %v13248 = vpack.c.b16 %v11750, %v11743
  %v13249 = vpack.c.b16 %v11758, %v11751
  %v13250 = vpack.c.b16 %v11759, %v11752
  %v13251 = vpack.c.b16 %v11760, %v11753
  %v13252 = vpack.c.b16 %v11761, %v11754
  %v13253 = vpack.c.b16 %v11762, %v11755
  %v13254 = vpack.c.b16 %v11763, %v11756
  %v13255 = vpack.c.b16 %v11764, %v11757
  %v13256 = vpack.c.b16 %v11772, %v11765
  %v13257 = vpack.c.b16 %v11773, %v11766
  %v13258 = vpack.c.b16 %v11774, %v11767
  %v13259 = vpack.c.b16 %v11775, %v11768
  %v13260 = vpack.c.b16 %v11776, %v11769
  %v13261 = vpack.c.b16 %v11777, %v11770
  %v13262 = vpack.c.b16 %v11778, %v11771
  %v13263 = vpack.c.b16 %v11786, %v11779
  %v13264 = vpack.c.b16 %v11787, %v11780
  %v13265 = vpack.c.b16 %v11788, %v11781
  %v13266 = vpack.c.b16 %v11789, %v11782
  %v13267 = vpack.c.b16 %v11790, %v11783
  %v13268 = vpack.c.b16 %v11791, %v11784
  %v13269 = vpack.c.b16 %v11792, %v11785
  %v13270 = vpack.c.b16 %v11800, %v11793
  %v13271 = vpack.c.b16 %v11801, %v11794
  %v13272 = vpack.c.b16 %v11802, %v11795
  %v13273 = vpack.c.b16 %v11803, %v11796
  %v13274 = vpack.c.b16 %v11804, %v11797
  %v13275 = vpack.c.b16 %v11805, %v11798
  %v13276 = vpack.c.b16 %v11806, %v11799
  %v13277 = vpack.c.b16 %v11814, %v11807
  %v13278 = vpack.c.b16 %v11815, %v11808
  %v13279 = vpack.c.b16 %v11816, %v11809
  %v13280 = vpack.c.b16 %v11817, %v11810
  %v13281 = vpack.c.b16 %v11818, %v11811
  %v13282 = vpack.c.b16 %v11819, %v11812
  %v13283 = vpack.c.b16 %v11820, %v11813
  %v13284 = vpack.c.b16 %v11828, %v11821
  %v13285 = vpack.c.b16 %v11829, %v11822
  %v13286 = vpack.c.b16 %v11830, %v11823
  %v13287 = vpack.c.b16 %v11831, %v11824
  %v13288 = vpack.c.b16 %v11832, %v11825
  %v13289 = vpack.c.b16 %v11833, %v11826
  %v13290 = vpack.c.b16 %v11834, %v11827
  %v13291 = vpack.c.b16 %v11842, %v11835
  %v13292 = vpack.c.b16 %v11843, %v11836
  %v13293 = vpack.c.b16 %v11844, %v11837
  %v13294 = vpack.c.b16 %v11845, %v11838
  %v13295 = vpack.c.b16 %v11846, %v11839
  %v13296 = vpack.c.b16 %v11847, %v11840
  %v13297 = vpack.c.b16 %v11848, %v11841
  %v13298 = vpack.c.b16 %v11856, %v11849
  %v13299 = vpack.c.b16 %v11857, %v11850
  %v13300 = vpack.c.b16 %v11858, %v11851
  %v13301 = vpack.c.b16 %v11859, %v11852
  %v13302 = vpack.c.b16 %v11860, %v11853
  %v13303 = vpack.c.b16 %v11861, %v11854
  %v13304 = vpack.c.b16 %v11862, %v11855
  %v13305 = vpack.c.b16 %v11870, %v11863
  %v13306 = vpack.c.b16 %v11871, %v11864
  %v13307 = vpack.c.b16 %v11872, %v11865
  %v13308 = vpack.c.b16 %v11873, %v11866
  %v13309 = vpack.c.b16 %v11874, %v11867
  %v13310 = vpack.c.b16 %v11875, %v11868
  %v13311 = vpack.c.b16 %v11876, %v11869
  %v13312 = vpack.c.b16 %v11884, %v11877
  %v13313 = vpack.c.b16 %v11885, %v11878
  %v13314 = vpack.c.b16 %v11886, %v11879
  %v13315 = vpack.c.b16 %v11887, %v11880
  %v13316 = vpack.c.b16 %v11888, %v11881
  %v13317 = vpack.c.b16 %v11889, %v11882
  %v13318 = vpack.c.b16 %v11890, %v11883
  %v13319 = vpack.c.b16 %v11898, %v11891
  %v13320 = vpack.c.b16 %v11899, %v11892
  %v13321 = vpack.c.b16 %v11900, %v11893
  %v13322 = vpack.c.b16 %v11901, %v11894
  %v13323 = vpack.c.b16 %v11902, %v11895
  %v13324 = vpack.c.b16 %v11903, %v11896
  %v13325 = vpack.c.b16 %v11904, %v11897
  %v13326 = vpack.c.b16 %v11912, %v11905
  %v13327 = vpack.c.b16 %v11913, %v11906
  %v13328 = vpack.c.b16 %v11914, %v11907
  %v13329 = vpack.c.b16 %v11915, %v11908
  %v13330 = vpack.c.b16 %v11916, %v11909
  %v13331 = vpack.c.b16 %v11917, %v11910
  %v13332 = vpack.c.b16 %v11918, %v11911
  %v13333 = vpack.c.b16 %v11926, %v11919
  %v13334 = vpack.c.b16 %v11927, %v11920
  %v13335 = vpack.c.b16 %v11928, %v11921
  %v13336 = vpack.c.b16 %v11929, %v11922
  %v13337 = vpack.c.b16 %v11930, %v11923
  %v13338 = vpack.c.b16 %v11931, %v11924
  %v13339 = vpack.c.b16 %v11932, %v11925
  %v13340 = vpack.c.b16 %v11940, %v11933
  %v13341 = vpack.c.b16 %v11941, %v11934
  %v13342 = vpack.c.b16 %v11942, %v11935
  %v13343 = vpack.c.b16 %v11943, %v11936
  %v13344 = vpack.c.b16 %v11944, %v11937
  %v13345 = vpack.c.b16 %v11945, %v11938
  %v13346 = vpack.c.b16 %v11946, %v11939
  %v13347 = vpack.c.b16 %v11954, %v11947
  %v13348 = vpack.c.b16 %v11955, %v11948
  %v13349 = vpack.c.b16 %v11956, %v11949
  %v13350 = vpack.c.b16 %v11957, %v11950
  %v13351 = vpack.c.b16 %v11958, %v11951
  %v13352 = vpack.c.b16 %v11959, %v11952
  %v13353 = vpack.c.b16 %v11960, %v11953
  %v13354 = vpack.c.b16 %v11968, %v11961
  %v13355 = vpack.c.b16 %v11969, %v11962
  %v13356 = vpack.c.b16 %v11970, %v11963
  %v13357 = vpack.c.b16 %v11971, %v11964
  %v13358 = vpack.c.b16 %v11972, %v11965
  %v13359 = vpack.c.b16 %v11973, %v11966
  %v13360 = vpack.c.b16 %v11974, %v11967
  %v13361 = vpack.c.b16 %v11982, %v11975
  %v13362 = vpack.c.b16 %v11983, %v11976
  %v13363 = vpack.c.b16 %v11984, %v11977
  %v13364 = vpack.c.b16 %v11985, %v11978
  %v13365 = vpack.c.b16 %v11986, %v11979
  %v13366 = vpack.c.b16 %v11987, %v11980
  %v13367 = vpack.c.b16 %v11988, %v11981
  %v13368 = vpack.c.b16 %v11996, %v11989
  %v13369 = vpack.c.b16 %v11997, %v11990
  %v13370 = vpack.c.b16 %v11998, %v11991
  %v13371 = vpack.c.b16 %v11999, %v11992
  %v13372 = vpack.c.b16 %v12000, %v11993
  %v13373 = vpack.c.b16 %v12001, %v11994
  %v13374 = vpack.c.b16 %v12002, %v11995
  %v13375 = vpack.c.b16 %v12010, %v12003
  %v13376 = vpack.c.b16 %v12011, %v12004
  %v13377 = vpack.c.b16 %v12012, %v12005
  %v13378 = vpack.c.b16 %v12013, %v12006
  %v13379 = vpack.c.b16 %v12014, %v12007
  %v13380 = vpack.c.b16 %v12015, %v12008
  %v13381 = vpack.c.b16 %v12016, %v12009
  %v13382 = vpack.c.b16 %v12024, %v12017
  %v13383 = vpack.c.b16 %v12025, %v12018
  %v13384 = vpack.c.b16 %v12026, %v12019
  %v13385 = vpack.c.b16 %v12027, %v12020
  %v13386 = vpack.c.b16 %v12028, %v12021
  %v13387 = vpack.c.b16 %v12029, %v12022
  %v13388 = vpack.c.b16 %v12030, %v12023
  %v13389 = vpack.c.b16 %v12038, %v12031
  %v13390 = vpack.c.b16 %v12039, %v12032
  %v13391 = vpack.c.b16 %v12040, %v12033
  %v13392 = vpack.c.b16 %v12041, %v12034
  %v13393 = vpack.c.b16 %v12042, %v12035
  %v13394 = vpack.c.b16 %v12043, %v12036
  %v13395 = vpack.c.b16 %v12044, %v12037
  %v13396 = vpack.c.b16 %v12052, %v12045
  %v13397 = vpack.c.b16 %v12053, %v12046
  %v13398 = vpack.c.b16 %v12054, %v12047
  %v13399 = vpack.c.b16 %v12055, %v12048
  %v13400 = vpack.c.b16 %v12056, %v12049
  %v13401 = vpack.c.b16 %v12057, %v12050
  %v13402 = vpack.c.b16 %v12058, %v12051
  %v13403 = vpack.c.b16 %v12066, %v12059
  %v13404 = vpack.c.b16 %v12067, %v12060
  %v13405 = vpack.c.b16 %v12068, %v12061
  %v13406 = vpack.c.b16 %v12069, %v12062
  %v13407 = vpack.c.b16 %v12070, %v12063
  %v13408 = vpack.c.b16 %v12071, %v12064
  %v13409 = vpack.c.b16 %v12072, %v12065
  %v13410 = vpack.c.b16 %v12080, %v12073
  %v13411 = vpack.c.b16 %v12081, %v12074
  %v13412 = vpack.c.b16 %v12082, %v12075
  %v13413 = vpack.c.b16 %v12083, %v12076
  %v13414 = vpack.c.b16 %v12084, %v12077
  %v13415 = vpack.c.b16 %v12085, %v12078
  %v13416 = vpack.c.b16 %v12086, %v12079
  %v13417 = vpack.c.b16 %v12094, %v12087
  %v13418 = vpack.c.b16 %v12095, %v12088
  %v13419 = vpack.c.b16 %v12096, %v12089
  %v13420 = vpack.c.b16 %v12097, %v12090
  %v13421 = vpack.c.b16 %v12098, %v12091
  %v13422 = vpack.c.b16 %v12099, %v12092
  %v13423 = vpack.c.b16 %v12100, %v12093
  %v13424 = vpack.c.b16 %v12108, %v12101
  %v13425 = vpack.c.b16 %v12109, %v12102
  %v13426 = vpack.c.b16 %v12110, %v12103
  %v13427 = vpack.c.b16 %v12111, %v12104
  %v13428 = vpack.c.b16 %v12112, %v12105
  %v13429 = vpack.c.b16 %v12113, %v12106
  %v13430 = vpack.c.b16 %v12114, %v12107
  %v13431 = vpack.c.b16 %v12122, %v12115
  %v13432 = vpack.c.b16 %v12123, %v12116
  %v13433 = vpack.c.b16 %v12124, %v12117
  %v13434 = vpack.c.b16 %v12125, %v12118
  %v13435 = vpack.c.b16 %v12126, %v12119
  %v13436 = vpack.c.b16 %v12127, %v12120
  %v13437 = vpack.c.b16 %v12128, %v12121
  %v13438 = vpack.c.b16 %v12136, %v12129
  %v13439 = vpack.c.b16 %v12137, %v12130
  %v13440 = vpack.c.b16 %v12138, %v12131
  %v13441 = vpack.c.b16 %v12139, %v12132
  %v13442 = vpack.c.b16 %v12140, %v12133
  %v13443 = vpack.c.b16 %v12141, %v12134
  %v13444 = vpack.c.b16 %v12142, %v12135
  %v13445 = vpack.c.b16 %v12150, %v12143
  %v13446 = vpack.c.b16 %v12151, %v12144
  %v13447 = vpack.c.b16 %v12152, %v12145
  %v13448 = vpack.c.b16 %v12153, %v12146
  %v13449 = vpack.c.b16 %v12154, %v12147
  %v13450 = vpack.c.b16 %v12155, %v12148
  %v13451 = vpack.c.b16 %v12156, %v12149
  %v13452 = vpack.c.b16 %v12164, %v12157
  %v13453 = vpack.c.b16 %v12165, %v12158
  %v13454 = vpack.c.b16 %v12166, %v12159
  %v13455 = vpack.c.b16 %v12167, %v12160
  %v13456 = vpack.c.b16 %v12168, %v12161
  %v13457 = vpack.c.b16 %v12169, %v12162
  %v13458 = vpack.c.b16 %v12170, %v12163
  %v13459 = vpack.c.b16 %v12178, %v12171
  %v13460 = vpack.c.b16 %v12179, %v12172
  %v13461 = vpack.c.b16 %v12180, %v12173
  %v13462 = vpack.c.b16 %v12181, %v12174
  %v13463 = vpack.c.b16 %v12182, %v12175
  %v13464 = vpack.c.b16 %v12183, %v12176
  %v13465 = vpack.c.b16 %v12184, %v12177
  %v13466 = vpack.c.b16 %v12192, %v12185
  %v13467 = vpack.c.b16 %v12193, %v12186
  %v13468 = vpack.c.b16 %v12194, %v12187
  %v13469 = vpack.c.b16 %v12195, %v12188
  %v13470 = vpack.c.b16 %v12196, %v12189
  %v13471 = vpack.c.b16 %v12197, %v12190
  %v13472 = vpack.c.b16 %v12198, %v12191
  %v13473 = vpack.c.b16 %v12206, %v12199
  %v13474 = vpack.c.b16 %v12207, %v12200
  %v13475 = vpack.c.b16 %v12208, %v12201
  %v13476 = vpack.c.b16 %v12209, %v12202
  %v13477 = vpack.c.b16 %v12210, %v12203
  %v13478 = vpack.c.b16 %v12211, %v12204
  %v13479 = vpack.c.b16 %v12212, %v12205
  %v13480 = vpack.c.b16 %v12220, %v12213
  %v13481 = vpack.c.b16 %v12221, %v12214
  %v13482 = vpack.c.b16 %v12222, %v12215
  %v13483 = vpack.c.b16 %v12223, %v12216
  %v13484 = vpack.c.b16 %v12224, %v12217
  %v13485 = vpack.c.b16 %v12225, %v12218
  %v13486 = vpack.c.b16 %v12226, %v12219
  %v13487 = vpack.c.b16 %v12234, %v12227
  %v13488 = vpack.c.b16 %v12235, %v12228
  %v13489 = vpack.c.b16 %v12236, %v12229
  %v13490 = vpack.c.b16 %v12237, %v12230
  %v13491 = vpack.c.b16 %v12238, %v12231
  %v13492 = vpack.c.b16 %v12239, %v12232
  %v13493 = vpack.c.b16 %v12240, %v12233
  %v13494 = vpack.c.b16 %v12248, %v12241
  %v13495 = vpack.c.b16 %v12249, %v12242
  %v13496 = vpack.c.b16 %v12250, %v12243
  %v13497 = vpack.c.b16 %v12251, %v12244
  %v13498 = vpack.c.b16 %v12252, %v12245
  %v13499 = vpack.c.b16 %v12253, %v12246
  %v13500 = vpack.c.b16 %v12254, %v12247
  %v13501 = vpack.c.b16 %v12262, %v12255
  %v13502 = vpack.c.b16 %v12263, %v12256
  %v13503 = vpack.c.b16 %v12264, %v12257
  %v13504 = vpack.c.b16 %v12265, %v12258
  %v13505 = vpack.c.b16 %v12266, %v12259
  %v13506 = vpack.c.b16 %v12267, %v12260
  %v13507 = vpack.c.b16 %v12268, %v12261
  %v13508 = vpack.c.b16 %v12276, %v12269
  %v13509 = vpack.c.b16 %v12277, %v12270
  %v13510 = vpack.c.b16 %v12278, %v12271
  %v13511 = vpack.c.b16 %v12279, %v12272
  %v13512 = vpack.c.b16 %v12280, %v12273
  %v13513 = vpack.c.b16 %v12281, %v12274
  %v13514 = vpack.c.b16 %v12282, %v12275
  %v13515 = vpack.c.b16 %v12290, %v12283
  %v13516 = vpack.c.b16 %v12291, %v12284
  %v13517 = vpack.c.b16 %v12292, %v12285
  %v13518 = vpack.c.b16 %v12293, %v12286
  %v13519 = vpack.c.b16 %v12294, %v12287
  %v13520 = vpack.c.b16 %v12295, %v12288
  %v13521 = vpack.c.b16 %v12296, %v12289
  %v13522 = vpack.c.b16 %v12304, %v12297
  %v13523 = vpack.c.b16 %v12305, %v12298
  %v13524 = vpack.c.b16 %v12306, %v12299
  %v13525 = vpack.c.b16 %v12307, %v12300
  %v13526 = vpack.c.b16 %v12308, %v12301
  %v13527 = vpack.c.b16 %v12309, %v12302
  %v13528 = vpack.c.b16 %v12310, %v12303
  %v13529 = vpack.c.b16 %v12318, %v12311
  %v13530 = vpack.c.b16 %v12319, %v12312
  %v13531 = vpack.c.b16 %v12320, %v12313
  %v13532 = vpack.c.b16 %v12321, %v12314
  %v13533 = vpack.c.b16 %v12322, %v12315
  %v13534 = vpack.c.b16 %v12323, %v12316
  %v13535 = vpack.c.b16 %v12324, %v12317
  %v13536 = vpack.c.b16 %v12332, %v12325
  %v13537 = vpack.c.b16 %v12333, %v12326
  %v13538 = vpack.c.b16 %v12334, %v12327
  %v13539 = vpack.c.b16 %v12335, %v12328
  %v13540 = vpack.c.b16 %v12336, %v12329
  %v13541 = vpack.c.b16 %v12337, %v12330
  %v13542 = vpack.c.b16 %v12338, %v12331
  %v13543 = vpack.c.b16 %v12346, %v12339
  %v13544 = vpack.c.b16 %v12347, %v12340
  %v13545 = vpack.c.b16 %v12348, %v12341
  %v13546 = vpack.c.b16 %v12349, %v12342
  %v13547 = vpack.c.b16 %v12350, %v12343
  %v13548 = vpack.c.b16 %v12351, %v12344
  %v13549 = vpack.c.b16 %v12352, %v12345
  %v13550 = vpack.c.b16 %v12360, %v12353
  %v13551 = vpack.c.b16 %v12361, %v12354
  %v13552 = vpack.c.b16 %v12362, %v12355
  %v13553 = vpack.c.b16 %v12363, %v12356
  %v13554 = vpack.c.b16 %v12364, %v12357
  %v13555 = vpack.c.b16 %v12365, %v12358
  %v13556 = vpack.c.b16 %v12366, %v12359
  %v13557 = vpack.c.b16 %v12374, %v12367
  %v13558 = vpack.c.b16 %v12375, %v12368
  %v13559 = vpack.c.b16 %v12376, %v12369
  %v13560 = vpack.c.b16 %v12377, %v12370
  %v13561 = vpack.c.b16 %v12378, %v12371
  %v13562 = vpack.c.b16 %v12379, %v12372
  %v13563 = vpack.c.b16 %v12380, %v12373
  %v13564 = vpack.c.b16 %v12388, %v12381
  %v13565 = vpack.c.b16 %v12389, %v12382
  %v13566 = vpack.c.b16 %v12390, %v12383
  %v13567 = vpack.c.b16 %v12391, %v12384
  %v13568 = vpack.c.b16 %v12392, %v12385
  %v13569 = vpack.c.b16 %v12393, %v12386
  %v13570 = vpack.c.b16 %v12394, %v12387
  %v13571 = vpack.c.b16 %v12402, %v12395
  %v13572 = vpack.c.b16 %v12403, %v12396
  %v13573 = vpack.c.b16 %v12404, %v12397
  %v13574 = vpack.c.b16 %v12405, %v12398
  %v13575 = vpack.c.b16 %v12406, %v12399
  %v13576 = vpack.c.b16 %v12407, %v12400
  %v13577 = vpack.c.b16 %v12408, %v12401
  %v13578 = vpack.c.b16 %v12416, %v12409
  %v13579 = vpack.c.b16 %v12417, %v12410
  %v13580 = vpack.c.b16 %v12418, %v12411
  %v13581 = vpack.c.b16 %v12419, %v12412
  %v13582 = vpack.c.b16 %v12420, %v12413
  %v13583 = vpack.c.b16 %v12421, %v12414
  %v13584 = vpack.c.b16 %v12422, %v12415
  %v13585 = vpack.c.b16 %v12430, %v12423
  %v13586 = vpack.c.b16 %v12431, %v12424
  %v13587 = vpack.c.b16 %v12432, %v12425
  %v13588 = vpack.c.b16 %v12433, %v12426
  %v13589 = vpack.c.b16 %v12434, %v12427
  %v13590 = vpack.c.b16 %v12435, %v12428
  %v13591 = vpack.c.b16 %v12436, %v12429
  %v13592 = vpack.c.b16 %v12444, %v12437
  %v13593 = vpack.c.b16 %v12445, %v12438
  %v13594 = vpack.c.b16 %v12446, %v12439
  %v13595 = vpack.c.b16 %v12447, %v12440
  %v13596 = vpack.c.b16 %v12448, %v12441
  %v13597 = vpack.c.b16 %v12449, %v12442
  %v13598 = vpack.c.b16 %v12450, %v12443
  %v13599 = vpack.c.b16 %v12458, %v12451
  %v13600 = vpack.c.b16 %v12459, %v12452
  %v13601 = vpack.c.b16 %v12460, %v12453
  %v13602 = vpack.c.b16 %v12461, %v12454
  %v13603 = vpack.c.b16 %v12462, %v12455
  %v13604 = vpack.c.b16 %v12463, %v12456
  %v13605 = vpack.c.b16 %v12464, %v12457
  %v13606 = vpack.c.b16 %v12472, %v12465
  %v13607 = vpack.c.b16 %v12473, %v12466
  %v13608 = vpack.c.b16 %v12474, %v12467
  %v13609 = vpack.c.b16 %v12475, %v12468
  %v13610 = vpack.c.b16 %v12476, %v12469
  %v13611 = vpack.c.b16 %v12477, %v12470
  %v13612 = vpack.c.b16 %v12478, %v12471
  %v13613 = vpack.c.b16 %v12486, %v12479
  %v13614 = vpack.c.b16 %v12487, %v12480
  %v13615 = vpack.c.b16 %v12488, %v12481
  %v13616 = vpack.c.b16 %v12489, %v12482
  %v13617 = vpack.c.b16 %v12490, %v12483
  %v13618 = vpack.c.b16 %v12491, %v12484
  %v13619 = vpack.c.b16 %v12492, %v12485
  %v13620 = vpack.c.b16 %v12500, %v12493
  %v13621 = vpack.c.b16 %v12501, %v12494
  %v13622 = vpack.c.b16 %v12502, %v12495
  %v13623 = vpack.c.b16 %v12503, %v12496
  %v13624 = vpack.c.b16 %v12504, %v12497
  %v13625 = vpack.c.b16 %v12505, %v12498
  %v13626 = vpack.c.b16 %v12506, %v12499
  %v13627 = vpack.c.b16 %v12514, %v12507
  %v13628 = vpack.c.b16 %v12515, %v12508
  %v13629 = vpack.c.b16 %v12516, %v12509
  %v13630 = vpack.c.b16 %v12517, %v12510
  %v13631 = vpack.c.b16 %v12518, %v12511
  %v13632 = vpack.c.b16 %v12519, %v12512
  %v13633 = vpack.c.b16 %v12520, %v12513
  %v13634 = vpack.c.b16 %v12528, %v12521
  %v13635 = vpack.c.b16 %v12529, %v12522
  %v13636 = vpack.c.b16 %v12530, %v12523
  %v13637 = vpack.c.b16 %v12531, %v12524
  %v13638 = vpack.c.b16 %v12532, %v12525
  %v13639 = vpack.c.b16 %v12533, %v12526
  %v13640 = vpack.c.b16 %v12534, %v12527
  %v13641 = vpack.c.b16 %v12542, %v12535
  %v13642 = vpack.c.b16 %v12543, %v12536
  %v13643 = vpack.c.b16 %v12544, %v12537
  %v13644 = vpack.c.b16 %v12545, %v12538
  %v13645 = vpack.c.b16 %v12546, %v12539
  %v13646 = vpack.c.b16 %v12547, %v12540
  %v13647 = vpack.c.b16 %v12548, %v12541
  %v13648 = vpack.c.b16 %v12556, %v12549
  %v13649 = vpack.c.b16 %v12557, %v12550
  %v13650 = vpack.c.b16 %v12558, %v12551
  %v13651 = vpack.c.b16 %v12559, %v12552
  %v13652 = vpack.c.b16 %v12560, %v12553
  %v13653 = vpack.c.b16 %v12561, %v12554
  %v13654 = vpack.c.b16 %v12562, %v12555
  %v13655 = vpack.c.b16 %v12570, %v12563
  %v13656 = vpack.c.b16 %v12571, %v12564
  %v13657 = vpack.c.b16 %v12572, %v12565
  %v13658 = vpack.c.b16 %v12573, %v12566
  %v13659 = vpack.c.b16 %v12574, %v12567
  %v13660 = vpack.c.b16 %v12575, %v12568
  %v13661 = vpack.c.b16 %v12576, %v12569
  %v13662 = vpack.c.b16 %v12584, %v12577
  %v13663 = vpack.c.b16 %v12585, %v12578
  %v13664 = vpack.c.b16 %v12586, %v12579
  %v13665 = vpack.c.b16 %v12587, %v12580
  %v13666 = vpack.c.b16 %v12588, %v12581
  %v13667 = vpack.c.b16 %v12589, %v12582
  %v13668 = vpack.c.b16 %v12590, %v12583
  %v13669 = vpack.c.b16 %v12598, %v12591
  %v13670 = vpack.c.b16 %v12599, %v12592
  %v13671 = vpack.c.b16 %v12600, %v12593
  %v13672 = vpack.c.b16 %v12601, %v12594
  %v13673 = vpack.c.b16 %v12602, %v12595
  %v13674 = vpack.c.b16 %v12603, %v12596
  %v13675 = vpack.c.b16 %v12604, %v12597
  %v13676 = vpack.c.b16 %v12612, %v12605
  %v13677 = vpack.c.b16 %v12613, %v12606
  %v13678 = vpack.c.b16 %v12614, %v12607
  %v13679 = vpack.c.b16 %v12615, %v12608
  %v13680 = vpack.c.b16 %v12616, %v12609
  %v13681 = vpack.c.b16 %v12617, %v12610
  %v13682 = vpack.c.b16 %v12618, %v12611
  %v13683 = vpack.c.b16 %v12626, %v12619
  %v13684 = vpack.c.b16 %v12627, %v12620
  %v13685 = vpack.c.b16 %v12628, %v12621
  %v13686 = vpack.c.b16 %v12629, %v12622
  %v13687 = vpack.c.b16 %v12630, %v12623
  %v13688 = vpack.c.b16 %v12631, %v12624
  %v13689 = vpack.c.b16 %v12632, %v12625
  %v13690 = vpack.c.b16 %v12640, %v12633
  %v13691 = vpack.c.b16 %v12641, %v12634
  %v13692 = vpack.c.b16 %v12642, %v12635
  %v13693 = vpack.c.b16 %v12643, %v12636
  %v13694 = vpack.c.b16 %v12644, %v12637
  %v13695 = vpack.c.b16 %v12645, %v12638
  %v13696 = vpack.c.b16 %v12646, %v12639
  %v13697 = vpack.c.b16 %v12654, %v12647
  %v13698 = vpack.c.b16 %v12655, %v12648
  %v13699 = vpack.c.b16 %v12656, %v12649
  %v13700 = vpack.c.b16 %v12657, %v12650
  %v13701 = vpack.c.b16 %v12658, %v12651
  %v13702 = vpack.c.b16 %v12659, %v12652
  %v13703 = vpack.c.b16 %v12660, %v12653
  %v13704 = vpack.c.b16 %v12668, %v12661
  %v13705 = vpack.c.b16 %v12669, %v12662
  %v13706 = vpack.c.b16 %v12670, %v12663
  %v13707 = vpack.c.b16 %v12671, %v12664
  %v13708 = vpack.c.b16 %v12672, %v12665
  %v13709 = vpack.c.b16 %v12673, %v12666
  %v13710 = vpack.c.b16 %v12674, %v12667
  %v13711 = vpack.c.b16 %v12682, %v12675
  %v13712 = vpack.c.b16 %v12683, %v12676
  %v13713 = vpack.c.b16 %v12684, %v12677
  %v13714 = vpack.c.b16 %v12685, %v12678
  %v13715 = vpack.c.b16 %v12686, %v12679
  %v13716 = vpack.c.b16 %v12687, %v12680
  %v13717 = vpack.c.b16 %v12688, %v12681
  %v13718 = vpack.c.b16 %v12696, %v12689
  %v13719 = vpack.c.b16 %v12697, %v12690
  %v13720 = vpack.c.b16 %v12698, %v12691
  %v13721 = vpack.c.b16 %v12699, %v12692
  %v13722 = vpack.c.b16 %v12700, %v12693
  %v13723 = vpack.c.b16 %v12701, %v12694
  %v13724 = vpack.c.b16 %v12702, %v12695
  %v13725 = vpack.c.b16 %v12710, %v12703
  %v13726 = vpack.c.b16 %v12711, %v12704
  %v13727 = vpack.c.b16 %v12712, %v12705
  %v13728 = vpack.c.b16 %v12713, %v12706
  %v13729 = vpack.c.b16 %v12714, %v12707
  %v13730 = vpack.c.b16 %v12715, %v12708
  %v13731 = vpack.c.b16 %v12716, %v12709
  %v13732 = vpack.c.b16 %v12724, %v12717
  %v13733 = vpack.c.b16 %v12725, %v12718
  %v13734 = vpack.c.b16 %v12726, %v12719
  %v13735 = vpack.c.b16 %v12727, %v12720
  %v13736 = vpack.c.b16 %v12728, %v12721
  %v13737 = vpack.c.b16 %v12729, %v12722
  %v13738 = vpack.c.b16 %v12730, %v12723
  %v13739 = vpack.c.b16 %v12738, %v12731
  %v13740 = vpack.c.b16 %v12739, %v12732
  %v13741 = vpack.c.b16 %v12740, %v12733
  %v13742 = vpack.c.b16 %v12741, %v12734
  %v13743 = vpack.c.b16 %v12742, %v12735
  %v13744 = vpack.c.b16 %v12743, %v12736
  %v13745 = vpack.c.b16 %v12744, %v12737
  %v13746 = vpack.c.b16 %v12752, %v12745
  %v13747 = vpack.c.b16 %v12753, %v12746
  %v13748 = vpack.c.b16 %v12754, %v12747
  %v13749 = vpack.c.b16 %v12755, %v12748
  %v13750 = vpack.c.b16 %v12756, %v12749
  %v13751 = vpack.c.b16 %v12757, %v12750
  %v13752 = vpack.c.b16 %v12758, %v12751
  %v13753 = vpack.c.b16 %v12766, %v12759
  %v13754 = vpack.c.b16 %v12767, %v12760
  %v13755 = vpack.c.b16 %v12768, %v12761
  %v13756 = vpack.c.b16 %v12769, %v12762
  %v13757 = vpack.c.b16 %v12770, %v12763
  %v13758 = vpack.c.b16 %v12771, %v12764
  %v13759 = vpack.c.b16 %v12772, %v12765
  %v13760 = vpack.c.b16 %v12780, %v12773
  %v13761 = vpack.c.b16 %v12781, %v12774
  %v13762 = vpack.c.b16 %v12782, %v12775
  %v13763 = vpack.c.b16 %v12783, %v12776
  %v13764 = vpack.c.b16 %v12784, %v12777
  %v13765 = vpack.c.b16 %v12785, %v12778
  %v13766 = vpack.c.b16 %v12786, %v12779
  %v13767 = vpack.c.b16 %v12794, %v12787
  %v13768 = vpack.c.b16 %v12795, %v12788
  %v13769 = vpack.c.b16 %v12796, %v12789
  %v13770 = vpack.c.b16 %v12797, %v12790
  %v13771 = vpack.c.b16 %v12798, %v12791
  %v13772 = vpack.c.b16 %v12799, %v12792
  %v13773 = vpack.c.b16 %v12800, %v12793
  %v13774 = vpack.c.b16 %v12808, %v12801
  %v13775 = vpack.c.b16 %v12809, %v12802
  %v13776 = vpack.c.b16 %v12810, %v12803
  %v13777 = vpack.c.b16 %v12811, %v12804
  %v13778 = vpack.c.b16 %v12812, %v12805
  %v13779 = vpack.c.b16 %v12813, %v12806
  %v13780 = vpack.c.b16 %v12814, %v12807
  %v13781 = vpack.c.b16 %v12822, %v12815
  %v13782 = vpack.c.b16 %v12823, %v12816
  %v13783 = vpack.c.b16 %v12824, %v12817
  %v13784 = vpack.c.b16 %v12825, %v12818
  %v13785 = vpack.c.b16 %v12826, %v12819
  %v13786 = vpack.c.b16 %v12827, %v12820
  %v13787 = vpack.c.b16 %v12828, %v12821
  %v13788 = vpack.c.b16 %v12836, %v12829
  %v13789 = vpack.c.b16 %v12837, %v12830
  %v13790 = vpack.c.b16 %v12838, %v12831
  %v13791 = vpack.c.b16 %v12839, %v12832
  %v13792 = vpack.c.b16 %v12840, %v12833
  %v13793 = vpack.c.b16 %v12841, %v12834
  %v13794 = vpack.c.b16 %v12842, %v12835
  %v13795 = vpack.c.b16 %v12850, %v12843
  %v13796 = vpack.c.b16 %v12851, %v12844
  %v13797 = vpack.c.b16 %v12852, %v12845
  %v13798 = vpack.c.b16 %v12853, %v12846
  %v13799 = vpack.c.b16 %v12854, %v12847
  %v13800 = vpack.c.b16 %v12855, %v12848
  %v13801 = vpack.c.b16 %v12856, %v12849
  %v13802 = vpack.c.b16 %v12864, %v12857
  %v13803 = vpack.c.b16 %v12865, %v12858
  %v13804 = vpack.c.b16 %v12866, %v12859
  %v13805 = vpack.c.b16 %v12867, %v12860
  %v13806 = vpack.c.b16 %v12868, %v12861
  %v13807 = vpack.c.b16 %v12869, %v12862
  %v13808 = vpack.c.b16 %v12870, %v12863
  %v13809 = vpack.c.b16 %v12878, %v12871
  %v13810 = vpack.c.b16 %v12879, %v12872
  %v13811 = vpack.c.b16 %v12880, %v12873
  %v13812 = vpack.c.b16 %v12881, %v12874
  %v13813 = vpack.c.b16 %v12882, %v12875
  %v13814 = vpack.c.b16 %v12883, %v12876
  %v13815 = vpack.c.b16 %v12884, %v12877
  %v13816 = vpack.c.b16 %v12892, %v12885
  %v13817 = vpack.c.b16 %v12893, %v12886
  %v13818 = vpack.c.b16 %v12894, %v12887
  %v13819 = vpack.c.b16 %v12895, %v12888
  %v13820 = vpack.c.b16 %v12896, %v12889
  %v13821 = vpack.c.b16 %v12897, %v12890
  %v13822 = vpack.c.b16 %v12898, %v12891
  %v13823 = vpack.c.b16 %v12906, %v12899
  %v13824 = vpack.c.b16 %v12907, %v12900
  %v13825 = vpack.c.b16 %v12908, %v12901
  %v13826 = vpack.c.b16 %v12909, %v12902
  %v13827 = vpack.c.b16 %v12910, %v12903
  %v13828 = vpack.c.b16 %v12911, %v12904
  %v13829 = vpack.c.b16 %v12912, %v12905
  %v13830 = vpack.c.b16 %v12920, %v12913
  %v13831 = vpack.c.b16 %v12921, %v12914
  %v13832 = vpack.c.b16 %v12922, %v12915
  %v13833 = vpack.c.b16 %v12923, %v12916
  %v13834 = vpack.c.b16 %v12924, %v12917
  %v13835 = vpack.c.b16 %v12925, %v12918
  %v13836 = vpack.c.b16 %v12926, %v12919
  %v13837 = vpack.c.b16 %v12934, %v12927
  %v13838 = vpack.c.b16 %v12935, %v12928
  %v13839 = vpack.c.b16 %v12936, %v12929
  %v13840 = vpack.c.b16 %v12937, %v12930
  %v13841 = vpack.c.b16 %v12938, %v12931
  %v13842 = vpack.c.b16 %v12939, %v12932
  %v13843 = vpack.c.b16 %v12940, %v12933
  %v13844 = vpack.c.b16 %v12948, %v12941
  %v13845 = vpack.c.b16 %v12949, %v12942
  %v13846 = vpack.c.b16 %v12950, %v12943
  %v13847 = vpack.c.b16 %v12951, %v12944
  %v13848 = vpack.c.b16 %v12952, %v12945
  %v13849 = vpack.c.b16 %v12953, %v12946
  %v13850 = vpack.c.b16 %v12954, %v12947
  %v13851 = vpack.c.b16 %v12962, %v12955
  %v13852 = vpack.c.b16 %v12963, %v12956
  %v13853 = vpack.c.b16 %v12964, %v12957
  %v13854 = vpack.c.b16 %v12965, %v12958
  %v13855 = vpack.c.b16 %v12966, %v12959
  %v13856 = vpack.c.b16 %v12967, %v12960
  %v13857 = vpack.c.b16 %v12968, %v12961
  %v13858 = vpack.c.b16 %v12976, %v12969
  %v13859 = vpack.c.b16 %v12977, %v12970
  %v13860 = vpack.c.b16 %v12978, %v12971
  %v13861 = vpack.c.b16 %v12979, %v12972
  %v13862 = vpack.c.b16 %v12980, %v12973
  %v13863 = vpack.c.b16 %v12981, %v12974
  %v13864 = vpack.c.b16 %v12982, %v12975
  %v13865 = vpack.c.b16 %v12990, %v12983
  %v13866 = vpack.c.b16 %v12991, %v12984
  %v13867 = vpack.c.b16 %v12992, %v12985
  %v13868 = vpack.c.b16 %v12993, %v12986
  %v13869 = vpack.c.b16 %v12994, %v12987
  %v13870 = vpack.c.b16 %v12995, %v12988
  %v13871 = vpack.c.b16 %v12996, %v12989
  %v13872 = vpack.c.b16 %v13004, %v12997
  %v13873 = vpack.c.b16 %v13005, %v12998
  %v13874 = vpack.c.b16 %v13006, %v12999
  %v13875 = vpack.c.b16 %v13007, %v13000
  %v13876 = vpack.c.b16 %v13008, %v13001
  %v13877 = vpack.c.b16 %v13009, %v13002
  %v13878 = vpack.c.b16 %v13010, %v13003
  %v13879 = vpack.c.b16 %v13018, %v13011
  %v13880 = vpack.c.b16 %v13019, %v13012
  %v13881 = vpack.c.b16 %v13020, %v13013
  %v13882 = vpack.c.b16 %v13021, %v13014
  %v13883 = vpack.c.b16 %v13022, %v13015
  %v13884 = vpack.c.b16 %v13023, %v13016
  %v13885 = vpack.c.b16 %v13024, %v13017
  %v13886 = vpack.c.b16 %v13032, %v13025
  %v13887 = vpack.c.b16 %v13033, %v13026
  %v13888 = vpack.c.b16 %v13034, %v13027
  %v13889 = vpack.c.b16 %v13035, %v13028
  %v13890 = vpack.c.b16 %v13036, %v13029
  %v13891 = vpack.c.b16 %v13037, %v13030
  %v13892 = vpack.c.b16 %v13038, %v13031
  %v13893 = vpack.c.b16 %v13046, %v13039
  %v13894 = vpack.c.b16 %v13047, %v13040
  %v13895 = vpack.c.b16 %v13048, %v13041
  %v13896 = vpack.c.b16 %v13049, %v13042
  %v13897 = vpack.c.b16 %v13050, %v13043
  %v13898 = vpack.c.b16 %v13051, %v13044
  %v13899 = vpack.c.b16 %v13052, %v13045
  %v13900 = vpack.c.b16 %v13060, %v13053
  %v13901 = vpack.c.b16 %v13061, %v13054
  %v13902 = vpack.c.b16 %v13062, %v13055
  %v13903 = vpack.c.b16 %v13063, %v13056
  %v13904 = vpack.c.b16 %v13064, %v13057
  %v13905 = vpack.c.b16 %v13065, %v13058
  %v13906 = vpack.c.b16 %v13066, %v13059
  %v13907 = vpack.c.b16 %v13074, %v13067
  %v13908 = vpack.c.b16 %v13075, %v13068
  %v13909 = vpack.c.b16 %v13076, %v13069
  %v13910 = vpack.c.b16 %v13077, %v13070
  %v13911 = vpack.c.b16 %v13078, %v13071
  %v13912 = vpack.c.b16 %v13079, %v13072
  %v13913 = vpack.c.b16 %v13080, %v13073
  %v13914 = vpack.c.b16 %v13088, %v13081
  %v13915 = vpack.c.b16 %v13089, %v13082
  %v13916 = vpack.c.b16 %v13090, %v13083
  %v13917 = vpack.c.b16 %v13091, %v13084
  %v13918 = vpack.c.b16 %v13092, %v13085
  %v13919 = vpack.c.b16 %v13093, %v13086
  %v13920 = vpack.c.b16 %v13094, %v13087
  %v13921 = vpack.c.b16 %v13102, %v13095
  %v13922 = vpack.c.b16 %v13103, %v13096
  %v13923 = vpack.c.b16 %v13104, %v13097
  %v13924 = vpack.c.b16 %v13105, %v13098
  %v13925 = vpack.c.b16 %v13106, %v13099
  %v13926 = vpack.c.b16 %v13107, %v13100
  %v13927 = vpack.c.b16 %v13108, %v13101
  %v13928 = vpack.c.b16 %v13116, %v13109
  %v13929 = vpack.c.b16 %v13117, %v13110
  %v13930 = vpack.c.b16 %v13118, %v13111
  %v13931 = vpack.c.b16 %v13119, %v13112
  %v13932 = vpack.c.b16 %v13120, %v13113
  %v13933 = vpack.c.b16 %v13121, %v13114
  %v13934 = vpack.c.b16 %v13122, %v13115
  %v13935 = vpack.c.b16 %v13130, %v13123
  %v13936 = vpack.c.b16 %v13131, %v13124
  %v13937 = vpack.c.b16 %v13132, %v13125
  %v13938 = vpack.c.b16 %v13133, %v13126
  %v13939 = vpack.c.b16 %v13134, %v13127
  %v13940 = vpack.c.b16 %v13135, %v13128
  %v13941 = vpack.c.b16 %v13136, %v13129
  %v13942 = vpack.c.b16 %v13144, %v13137
  %v13943 = vpack.c.b16 %v13145, %v13138
  %v13944 = vpack.c.b16 %v13146, %v13139
  %v13945 = vpack.c.b16 %v13147, %v13140
  %v13946 = vpack.c.b16 %v13148, %v13141
  %v13947 = vpack.c.b16 %v13149, %v13142
  %v13948 = vpack.c.b16 %v13150, %v13143
  %v13949 = vpack.c.b16 %v13158, %v13151
  %v13950 = vpack.c.b16 %v13159, %v13152
  %v13951 = vpack.c.b16 %v13160, %v13153
  %v13952 = vpack.c.b16 %v13161, %v13154
  %v13953 = vpack.c.b16 %v13162, %v13155
  %v13954 = vpack.c.b16 %v13163, %v13156
  %v13955 = vpack.c.b16 %v13164, %v13157
  %v13956 = vpack.c.b16 %v13165, %v13165
  %v13957 = vpack.c.b16 %v13166, %v13166
  %v13958 = vpack.c.b16 %v13167, %v13167
  %v13959 = vpack.c.b16 %v13168, %v13168
  %v13960 = vpack.c.b16 %v13169, %v13169
  %v13961 = vpack.c.b16 %v13170, %v13170
  %v13962 = vpack.c.b16 %v13171, %v13171
  %vm14747 = vcmask 64512
  %v14749 = vsel %vm14747, %v9759, 0
  %vm14751 = vcmask 1043456
  %v14753 = vsel %vm14751, %v13956, 0
  %v14756 = vsel %vm14751, %v13957, 0
  %v14759 = vsel %vm14751, %v13958, 0
  %v14762 = vsel %vm14751, %v13959, 0
  %v14765 = vsel %vm14751, %v13960, 0
  %v14768 = vsel %vm14751, %v13961, 0
  %v14771 = vsel %vm14751, %v13962, 0
  %14773 = vmatprep.subr.bf16.mxu0 %v13173
  %14774 = vmatpush1.bf16.msra.mxu0 %v13172
  %14775 = vmatprep.subr.bf16.mxu0 %v13180
  %14776 = vmatpush1.bf16.msra.mxu0 %v13179
  %14777 = vmatprep.subr.bf16.mxu0 %v13187
  %14778 = vmatpush1.bf16.msra.mxu0 %v13186
  %14779 = vmatprep.subr.bf16.mxu0 %v13194
  %14780 = vmatpush1.bf16.msra.mxu0 %v13193
  %14781 = vmatprep.subr.bf16.mxu0 %v13201
  %14782 = vmatpush1.bf16.msra.mxu0 %v13200
  %14783 = vmatprep.subr.bf16.mxu0 %v13208
  %14784 = vmatpush1.bf16.msra.mxu0 %v13207
  %14785 = vmatprep.subr.bf16.mxu0 %v13215
  %14786 = vmatpush1.bf16.msra.mxu0 %v13214
  %14787 = vmatprep.subr.bf16.mxu0 %v13222
  %14788 = vmatpush1.bf16.msra.mxu0 %v13221
  %14789 = vmatprep.subr.bf16.mxu0 %v13229
  %14790 = vmatpush1.bf16.msra.mxu0 %v13228
  %14791 = vmatprep.subr.bf16.mxu0 %v13236
  %14792 = vmatpush1.bf16.msra.mxu0 %v13235
  %14793 = vmatprep.subr.bf16.mxu0 %v13243
  %14794 = vmatpush1.bf16.msra.mxu0 %v13242
  %14795 = vmatprep.subr.bf16.mxu0 %v13250
  %14796 = vmatpush1.bf16.msra.mxu0 %v13249
  %14797 = vmatprep.subr.bf16.mxu0 %v13257
  %14798 = vmatpush1.bf16.msra.mxu0 %v13256
  %14799 = vmatprep.subr.bf16.mxu0 %v13264
  %14800 = vmatpush1.bf16.msra.mxu0 %v13263
  %14801 = vmatprep.subr.bf16.mxu0 %v13271
  %14802 = vmatpush1.bf16.msra.mxu0 %v13270
  %14803 = vmatprep.subr.bf16.mxu0 %v13278
  %14804 = vmatpush1.bf16.msra.mxu0 %v13277
  %14805 = vmatprep.mubr.bf16.mxu0 %v9746
  %14806 = vmatmul.mubr.bf16.gmra.mrb[0].mxu0 %v9745
  %v14807 = vpop.f32.mrb[0].mxu0
  %v14808 = vadd.f32 %v10665, %v14807
  %v14809 = vpop.f32.mrb[0].mxu0
  %v14810 = vadd.f32 %v10669, %v14809
  %v14811 = vpop.f32.mrb[0].mxu0
  %v14812 = vpop.f32.mrb[0].mxu0
  %14813 = vdwg.mxu0
  %14814 = vmatprep.subr.bf16.mxu0 %v13285
  %14815 = vmatpush1.bf16.msra.mxu0 %v13284
  %14816 = vmatprep.subr.bf16.mxu0 %v13292
  %14817 = vmatpush1.bf16.msra.mxu0 %v13291
  %14818 = vmatprep.subr.bf16.mxu0 %v13299
  %14819 = vmatpush1.bf16.msra.mxu0 %v13298
  %14820 = vmatprep.subr.bf16.mxu0 %v13306
  %14821 = vmatpush1.bf16.msra.mxu0 %v13305
  %14822 = vmatprep.subr.bf16.mxu0 %v13313
  %14823 = vmatpush1.bf16.msra.mxu0 %v13312
  %14824 = vmatprep.subr.bf16.mxu0 %v13320
  %14825 = vmatpush1.bf16.msra.mxu0 %v13319
  %14826 = vmatprep.subr.bf16.mxu0 %v13327
  %14827 = vmatpush1.bf16.msra.mxu0 %v13326
  %14828 = vmatprep.subr.bf16.mxu0 %v13334
  %14829 = vmatpush1.bf16.msra.mxu0 %v13333
  %14830 = vmatprep.subr.bf16.mxu0 %v13341
  %14831 = vmatpush1.bf16.msra.mxu0 %v13340
  %14832 = vmatprep.subr.bf16.mxu0 %v13348
  %14833 = vmatpush1.bf16.msra.mxu0 %v13347
  %14834 = vmatprep.subr.bf16.mxu0 %v13355
  %14835 = vmatpush1.bf16.msra.mxu0 %v13354
  %14836 = vmatprep.subr.bf16.mxu0 %v13362
  %14837 = vmatpush1.bf16.msra.mxu0 %v13361
  %14838 = vmatprep.subr.bf16.mxu0 %v13369
  %14839 = vmatpush1.bf16.msra.mxu0 %v13368
  %14840 = vmatprep.subr.bf16.mxu0 %v13376
  %14841 = vmatpush1.bf16.msra.mxu0 %v13375
  %14842 = vmatprep.subr.bf16.mxu0 %v13383
  %14843 = vmatpush1.bf16.msra.mxu0 %v13382
  %14844 = vmatprep.subr.bf16.mxu0 %v13390
  %14845 = vmatpush1.bf16.msra.mxu0 %v13389
  %14846 = vmatprep.mubr.bf16.mxu0 %v9748
  %14847 = vmatmul.mubr.bf16.gmra.mrb[0].mxu0 %v9747
  %v14848 = vpop.f32.mrb[0].mxu0
  %v14849 = vadd.f32 %v14808, %v14848
  %v14850 = vpop.f32.mrb[0].mxu0
  %v14851 = vadd.f32 %v14810, %v14850
  %v14852 = vpop.f32.mrb[0].mxu0
  %v14853 = vpop.f32.mrb[0].mxu0
  %14854 = vdwg.mxu0
  %14855 = vmatprep.subr.bf16.mxu0 %v13397
  %14856 = vmatpush1.bf16.msra.mxu0 %v13396
  %14857 = vmatprep.subr.bf16.mxu0 %v13404
  %14858 = vmatpush1.bf16.msra.mxu0 %v13403
  %14859 = vmatprep.subr.bf16.mxu0 %v13411
  %14860 = vmatpush1.bf16.msra.mxu0 %v13410
  %14861 = vmatprep.subr.bf16.mxu0 %v13418
  %14862 = vmatpush1.bf16.msra.mxu0 %v13417
  %14863 = vmatprep.subr.bf16.mxu0 %v13425
  %14864 = vmatpush1.bf16.msra.mxu0 %v13424
  %14865 = vmatprep.subr.bf16.mxu0 %v13432
  %14866 = vmatpush1.bf16.msra.mxu0 %v13431
  %14867 = vmatprep.subr.bf16.mxu0 %v13439
  %14868 = vmatpush1.bf16.msra.mxu0 %v13438
  %14869 = vmatprep.subr.bf16.mxu0 %v13446
  %14870 = vmatpush1.bf16.msra.mxu0 %v13445
  %14871 = vmatprep.subr.bf16.mxu0 %v13453
  %14872 = vmatpush1.bf16.msra.mxu0 %v13452
  %14873 = vmatprep.subr.bf16.mxu0 %v13460
  %14874 = vmatpush1.bf16.msra.mxu0 %v13459
  %14875 = vmatprep.subr.bf16.mxu0 %v13467
  %14876 = vmatpush1.bf16.msra.mxu0 %v13466
  %14877 = vmatprep.subr.bf16.mxu0 %v13474
  %14878 = vmatpush1.bf16.msra.mxu0 %v13473
  %14879 = vmatprep.subr.bf16.mxu0 %v13481
  %14880 = vmatpush1.bf16.msra.mxu0 %v13480
  %14881 = vmatprep.subr.bf16.mxu0 %v13488
  %14882 = vmatpush1.bf16.msra.mxu0 %v13487
  %14883 = vmatprep.subr.bf16.mxu0 %v13495
  %14884 = vmatpush1.bf16.msra.mxu0 %v13494
  %14885 = vmatprep.subr.bf16.mxu0 %v13502
  %14886 = vmatpush1.bf16.msra.mxu0 %v13501
  %14887 = vmatprep.mubr.bf16.mxu0 %v9750
  %14888 = vmatmul.mubr.bf16.gmra.mrb[0].mxu0 %v9749
  %v14889 = vpop.f32.mrb[0].mxu0
  %v14890 = vadd.f32 %v14849, %v14889
  %v14891 = vpop.f32.mrb[0].mxu0
  %v14892 = vadd.f32 %v14851, %v14891
  %v14893 = vpop.f32.mrb[0].mxu0
  %v14894 = vpop.f32.mrb[0].mxu0
  %14895 = vdwg.mxu0
  %14896 = vmatprep.subr.bf16.mxu0 %v13509
  %14897 = vmatpush1.bf16.msra.mxu0 %v13508
  %14898 = vmatprep.subr.bf16.mxu0 %v13516
  %14899 = vmatpush1.bf16.msra.mxu0 %v13515
  %14900 = vmatprep.subr.bf16.mxu0 %v13523
  %14901 = vmatpush1.bf16.msra.mxu0 %v13522
  %14902 = vmatprep.subr.bf16.mxu0 %v13530
  %14903 = vmatpush1.bf16.msra.mxu0 %v13529
  %14904 = vmatprep.subr.bf16.mxu0 %v13537
  %14905 = vmatpush1.bf16.msra.mxu0 %v13536
  %14906 = vmatprep.subr.bf16.mxu0 %v13544
  %14907 = vmatpush1.bf16.msra.mxu0 %v13543
  %14908 = vmatprep.subr.bf16.mxu0 %v13551
  %14909 = vmatpush1.bf16.msra.mxu0 %v13550
  %14910 = vmatprep.subr.bf16.mxu0 %v13558
  %14911 = vmatpush1.bf16.msra.mxu0 %v13557
  %14912 = vmatprep.subr.bf16.mxu0 %v13565
  %14913 = vmatpush1.bf16.msra.mxu0 %v13564
  %14914 = vmatprep.subr.bf16.mxu0 %v13572
  %14915 = vmatpush1.bf16.msra.mxu0 %v13571
  %14916 = vmatprep.subr.bf16.mxu0 %v13579
  %14917 = vmatpush1.bf16.msra.mxu0 %v13578
  %14918 = vmatprep.subr.bf16.mxu0 %v13586
  %14919 = vmatpush1.bf16.msra.mxu0 %v13585
  %14920 = vmatprep.subr.bf16.mxu0 %v13593
  %14921 = vmatpush1.bf16.msra.mxu0 %v13592
  %14922 = vmatprep.subr.bf16.mxu0 %v13600
  %14923 = vmatpush1.bf16.msra.mxu0 %v13599
  %14924 = vmatprep.subr.bf16.mxu0 %v13607
  %14925 = vmatpush1.bf16.msra.mxu0 %v13606
  %14926 = vmatprep.subr.bf16.mxu0 %v13614
  %14927 = vmatpush1.bf16.msra.mxu0 %v13613
  %14928 = vmatprep.mubr.bf16.mxu0 %v9752
  %14929 = vmatmul.mubr.bf16.gmra.mrb[0].mxu0 %v9751
  %v14930 = vpop.f32.mrb[0].mxu0
  %v14931 = vadd.f32 %v14890, %v14930
  %v14932 = vpop.f32.mrb[0].mxu0
  %v14933 = vadd.f32 %v14892, %v14932
  %v14934 = vpop.f32.mrb[0].mxu0
  %v14935 = vpop.f32.mrb[0].mxu0
  %14936 = vdwg.mxu0
  %14937 = vmatprep.subr.bf16.mxu0 %v13621
  %14938 = vmatpush1.bf16.msra.mxu0 %v13620
  %14939 = vmatprep.subr.bf16.mxu0 %v13628
  %14940 = vmatpush1.bf16.msra.mxu0 %v13627
  %14941 = vmatprep.subr.bf16.mxu0 %v13635
  %14942 = vmatpush1.bf16.msra.mxu0 %v13634
  %14943 = vmatprep.subr.bf16.mxu0 %v13642
  %14944 = vmatpush1.bf16.msra.mxu0 %v13641
  %14945 = vmatprep.subr.bf16.mxu0 %v13649
  %14946 = vmatpush1.bf16.msra.mxu0 %v13648
  %14947 = vmatprep.subr.bf16.mxu0 %v13656
  %14948 = vmatpush1.bf16.msra.mxu0 %v13655
  %14949 = vmatprep.subr.bf16.mxu0 %v13663
  %14950 = vmatpush1.bf16.msra.mxu0 %v13662
  %14951 = vmatprep.subr.bf16.mxu0 %v13670
  %14952 = vmatpush1.bf16.msra.mxu0 %v13669
  %14953 = vmatprep.subr.bf16.mxu0 %v13677
  %14954 = vmatpush1.bf16.msra.mxu0 %v13676
  %14955 = vmatprep.subr.bf16.mxu0 %v13684
  %14956 = vmatpush1.bf16.msra.mxu0 %v13683
  %14957 = vmatprep.subr.bf16.mxu0 %v13691
  %14958 = vmatpush1.bf16.msra.mxu0 %v13690
  %14959 = vmatprep.subr.bf16.mxu0 %v13698
  %14960 = vmatpush1.bf16.msra.mxu0 %v13697
  %14961 = vmatprep.subr.bf16.mxu0 %v13705
  %14962 = vmatpush1.bf16.msra.mxu0 %v13704
  %14963 = vmatprep.subr.bf16.mxu0 %v13712
  %14964 = vmatpush1.bf16.msra.mxu0 %v13711
  %14965 = vmatprep.subr.bf16.mxu0 %v13719
  %14966 = vmatpush1.bf16.msra.mxu0 %v13718
  %14967 = vmatprep.subr.bf16.mxu0 %v13726
  %14968 = vmatpush1.bf16.msra.mxu0 %v13725
  %14969 = vmatprep.mubr.bf16.mxu0 %v9754
  %14970 = vmatmul.mubr.bf16.gmra.mrb[0].mxu0 %v9753
  %v14971 = vpop.f32.mrb[0].mxu0
  %v14972 = vadd.f32 %v14931, %v14971
  %v14973 = vpop.f32.mrb[0].mxu0
  %v14974 = vadd.f32 %v14933, %v14973
  %v14975 = vpop.f32.mrb[0].mxu0
  %v14976 = vpop.f32.mrb[0].mxu0
  %14977 = vdwg.mxu0
  %14978 = vmatprep.subr.bf16.mxu0 %v13733
  %14979 = vmatpush1.bf16.msra.mxu0 %v13732
  %14980 = vmatprep.subr.bf16.mxu0 %v13740
  %14981 = vmatpush1.bf16.msra.mxu0 %v13739
  %14982 = vmatprep.subr.bf16.mxu0 %v13747
  %14983 = vmatpush1.bf16.msra.mxu0 %v13746
  %14984 = vmatprep.subr.bf16.mxu0 %v13754
  %14985 = vmatpush1.bf16.msra.mxu0 %v13753
  %14986 = vmatprep.subr.bf16.mxu0 %v13761
  %14987 = vmatpush1.bf16.msra.mxu0 %v13760
  %14988 = vmatprep.subr.bf16.mxu0 %v13768
  %14989 = vmatpush1.bf16.msra.mxu0 %v13767
  %14990 = vmatprep.subr.bf16.mxu0 %v13775
  %14991 = vmatpush1.bf16.msra.mxu0 %v13774
  %14992 = vmatprep.subr.bf16.mxu0 %v13782
  %14993 = vmatpush1.bf16.msra.mxu0 %v13781
  %14994 = vmatprep.subr.bf16.mxu0 %v13789
  %14995 = vmatpush1.bf16.msra.mxu0 %v13788
  %14996 = vmatprep.subr.bf16.mxu0 %v13796
  %14997 = vmatpush1.bf16.msra.mxu0 %v13795
  %14998 = vmatprep.subr.bf16.mxu0 %v13803
  %14999 = vmatpush1.bf16.msra.mxu0 %v13802
  %15000 = vmatprep.subr.bf16.mxu0 %v13810
  %15001 = vmatpush1.bf16.msra.mxu0 %v13809
  %15002 = vmatprep.subr.bf16.mxu0 %v13817
  %15003 = vmatpush1.bf16.msra.mxu0 %v13816
  %15004 = vmatprep.subr.bf16.mxu0 %v13824
  %15005 = vmatpush1.bf16.msra.mxu0 %v13823
  %15006 = vmatprep.subr.bf16.mxu0 %v13831
  %15007 = vmatpush1.bf16.msra.mxu0 %v13830
  %15008 = vmatprep.subr.bf16.mxu0 %v13838
  %15009 = vmatpush1.bf16.msra.mxu0 %v13837
  %15010 = vmatprep.mubr.bf16.mxu0 %v9756
  %15011 = vmatmul.mubr.bf16.gmra.mrb[0].mxu0 %v9755
  %v15012 = vpop.f32.mrb[0].mxu0
  %v15013 = vadd.f32 %v14972, %v15012
  %v15014 = vpop.f32.mrb[0].mxu0
  %v15015 = vadd.f32 %v14974, %v15014
  %v15016 = vpop.f32.mrb[0].mxu0
  %v15017 = vpop.f32.mrb[0].mxu0
  %15018 = vdwg.mxu0
  %15019 = vmatprep.subr.bf16.mxu0 %v13845
  %15020 = vmatpush1.bf16.msra.mxu0 %v13844
  %15021 = vmatprep.subr.bf16.mxu0 %v13852
  %15022 = vmatpush1.bf16.msra.mxu0 %v13851
  %15023 = vmatprep.subr.bf16.mxu0 %v13859
  %15024 = vmatpush1.bf16.msra.mxu0 %v13858
  %15025 = vmatprep.subr.bf16.mxu0 %v13866
  %15026 = vmatpush1.bf16.msra.mxu0 %v13865
  %15027 = vmatprep.subr.bf16.mxu0 %v13873
  %15028 = vmatpush1.bf16.msra.mxu0 %v13872
  %15029 = vmatprep.subr.bf16.mxu0 %v13880
  %15030 = vmatpush1.bf16.msra.mxu0 %v13879
  %15031 = vmatprep.subr.bf16.mxu0 %v13887
  %15032 = vmatpush1.bf16.msra.mxu0 %v13886
  %15033 = vmatprep.subr.bf16.mxu0 %v13894
  %15034 = vmatpush1.bf16.msra.mxu0 %v13893
  %15035 = vmatprep.subr.bf16.mxu0 %v13901
  %15036 = vmatpush1.bf16.msra.mxu0 %v13900
  %15037 = vmatprep.subr.bf16.mxu0 %v13908
  %15038 = vmatpush1.bf16.msra.mxu0 %v13907
  %15039 = vmatprep.subr.bf16.mxu0 %v13915
  %15040 = vmatpush1.bf16.msra.mxu0 %v13914
  %15041 = vmatprep.subr.bf16.mxu0 %v13922
  %15042 = vmatpush1.bf16.msra.mxu0 %v13921
  %15043 = vmatprep.subr.bf16.mxu0 %v13929
  %15044 = vmatpush1.bf16.msra.mxu0 %v13928
  %15045 = vmatprep.subr.bf16.mxu0 %v13936
  %15046 = vmatpush1.bf16.msra.mxu0 %v13935
  %15047 = vmatprep.subr.bf16.mxu0 %v13943
  %15048 = vmatpush1.bf16.msra.mxu0 %v13942
  %15049 = vmatprep.subr.bf16.mxu0 %v13950
  %15050 = vmatpush1.bf16.msra.mxu0 %v13949
  %15051 = vmatprep.mubr.bf16.mxu0 %v9758
  %15052 = vmatmul.mubr.bf16.gmra.mrb[0].mxu0 %v9757
  %v15053 = vpop.f32.mrb[0].mxu0
  %v15054 = vadd.f32 %v15013, %v15053
  %v15055 = vpop.f32.mrb[0].mxu0
  %v15056 = vadd.f32 %v15015, %v15055
  %v15057 = vpop.f32.mrb[0].mxu0
  %v15058 = vpop.f32.mrb[0].mxu0
  %15059 = vdwg.mxu0
  %15060 = vmatprep.subr.bf16.mxu0 %v14756
  %15061 = vmatpush1.bf16.msra.mxu0 %v14753
  %15062 = vmatprep.subr.bf16.mxu0 0
  %15063 = vmatpush1.bf16.msra.mxu0 0
  %15064 = vmatprep.subr.bf16.mxu0 0
  %15065 = vmatpush1.bf16.msra.mxu0 0
  %15066 = vmatprep.subr.bf16.mxu0 0
  %15067 = vmatpush1.bf16.msra.mxu0 0
  %15068 = vmatprep.subr.bf16.mxu0 0
  %15069 = vmatpush1.bf16.msra.mxu0 0
  %15070 = vmatprep.subr.bf16.mxu0 0
  %15071 = vmatpush1.bf16.msra.mxu0 0
  %15072 = vmatprep.subr.bf16.mxu0 0
  %15073 = vmatpush1.bf16.msra.mxu0 0
  %15074 = vmatprep.subr.bf16.mxu0 0
  %15075 = vmatpush1.bf16.msra.mxu0 0
  %15076 = vmatprep.subr.bf16.mxu0 0
  %15077 = vmatpush1.bf16.msra.mxu0 0
  %15078 = vmatprep.subr.bf16.mxu0 0
  %15079 = vmatpush1.bf16.msra.mxu0 0
  %15080 = vmatprep.subr.bf16.mxu0 0
  %15081 = vmatpush1.bf16.msra.mxu0 0
  %15082 = vmatprep.subr.bf16.mxu0 0
  %15083 = vmatpush1.bf16.msra.mxu0 0
  %15084 = vmatprep.subr.bf16.mxu0 0
  %15085 = vmatpush1.bf16.msra.mxu0 0
  %15086 = vmatprep.subr.bf16.mxu0 0
  %15087 = vmatpush1.bf16.msra.mxu0 0
  %15088 = vmatprep.subr.bf16.mxu0 0
  %15089 = vmatpush1.bf16.msra.mxu0 0
  %15090 = vmatprep.subr.bf16.mxu0 0
  %15091 = vmatpush1.bf16.msra.mxu0 0
  %15092 = vmatprep.mubr.bf16.mxu0 0
  %15093 = vmatmul.mubr.bf16.gmra.mrb[0].mxu0 %v14749
  %v15094 = vpop.f32.mrb[0].mxu0
  %v15095 = vadd.f32 %v15054, %v15094
  %v15096 = vpop.f32.mrb[0].mxu0
  %v15097 = vadd.f32 %v15056, %v15096
  %v15098 = vpop.f32.mrb[0].mxu0
  %v15099 = vpop.f32.mrb[0].mxu0
  %15100 = vdwg.mxu0
  %15101 = vmatprep.subr.bf16.mxu0 %v13175
  %15102 = vmatpush1.bf16.msra.mxu0 %v13174
  %15103 = vmatprep.subr.bf16.mxu0 %v13182
  %15104 = vmatpush1.bf16.msra.mxu0 %v13181
  %15105 = vmatprep.subr.bf16.mxu0 %v13189
  %15106 = vmatpush1.bf16.msra.mxu0 %v13188
  %15107 = vmatprep.subr.bf16.mxu0 %v13196
  %15108 = vmatpush1.bf16.msra.mxu0 %v13195
  %15109 = vmatprep.subr.bf16.mxu0 %v13203
  %15110 = vmatpush1.bf16.msra.mxu0 %v13202
  %15111 = vmatprep.subr.bf16.mxu0 %v13210
  %15112 = vmatpush1.bf16.msra.mxu0 %v13209
  %15113 = vmatprep.subr.bf16.mxu0 %v13217
  %15114 = vmatpush1.bf16.msra.mxu0 %v13216
  %15115 = vmatprep.subr.bf16.mxu0 %v13224
  %15116 = vmatpush1.bf16.msra.mxu0 %v13223
  %15117 = vmatprep.subr.bf16.mxu0 %v13231
  %15118 = vmatpush1.bf16.msra.mxu0 %v13230
  %15119 = vmatprep.subr.bf16.mxu0 %v13238
  %15120 = vmatpush1.bf16.msra.mxu0 %v13237
  %15121 = vmatprep.subr.bf16.mxu0 %v13245
  %15122 = vmatpush1.bf16.msra.mxu0 %v13244
  %15123 = vmatprep.subr.bf16.mxu0 %v13252
  %15124 = vmatpush1.bf16.msra.mxu0 %v13251
  %15125 = vmatprep.subr.bf16.mxu0 %v13259
  %15126 = vmatpush1.bf16.msra.mxu0 %v13258
  %15127 = vmatprep.subr.bf16.mxu0 %v13266
  %15128 = vmatpush1.bf16.msra.mxu0 %v13265
  %15129 = vmatprep.subr.bf16.mxu0 %v13273
  %15130 = vmatpush1.bf16.msra.mxu0 %v13272
  %15131 = vmatprep.subr.bf16.mxu0 %v13280
  %15132 = vmatpush1.bf16.msra.mxu0 %v13279
  %15133 = vmatprep.mubr.bf16.mxu0 %v9746
  %15134 = vmatmul.mubr.bf16.gmra.mrb[0].mxu0 %v9745
  %v15135 = vpop.f32.mrb[0].mxu0
  %v15136 = vadd.f32 %v10673, %v15135
  %v15137 = vpop.f32.mrb[0].mxu0
  %v15138 = vadd.f32 %v10677, %v15137
  %v15139 = vpop.f32.mrb[0].mxu0
  %v15140 = vpop.f32.mrb[0].mxu0
  %15141 = vdwg.mxu0
  %15142 = vmatprep.subr.bf16.mxu0 %v13287
  %15143 = vmatpush1.bf16.msra.mxu0 %v13286
  %15144 = vmatprep.subr.bf16.mxu0 %v13294
  %15145 = vmatpush1.bf16.msra.mxu0 %v13293
  %15146 = vmatprep.subr.bf16.mxu0 %v13301
  %15147 = vmatpush1.bf16.msra.mxu0 %v13300
  %15148 = vmatprep.subr.bf16.mxu0 %v13308
  %15149 = vmatpush1.bf16.msra.mxu0 %v13307
  %15150 = vmatprep.subr.bf16.mxu0 %v13315
  %15151 = vmatpush1.bf16.msra.mxu0 %v13314
  %15152 = vmatprep.subr.bf16.mxu0 %v13322
  %15153 = vmatpush1.bf16.msra.mxu0 %v13321
  %15154 = vmatprep.subr.bf16.mxu0 %v13329
  %15155 = vmatpush1.bf16.msra.mxu0 %v13328
  %15156 = vmatprep.subr.bf16.mxu0 %v13336
  %15157 = vmatpush1.bf16.msra.mxu0 %v13335
  %15158 = vmatprep.subr.bf16.mxu0 %v13343
  %15159 = vmatpush1.bf16.msra.mxu0 %v13342
  %15160 = vmatprep.subr.bf16.mxu0 %v13350
  %15161 = vmatpush1.bf16.msra.mxu0 %v13349
  %15162 = vmatprep.subr.bf16.mxu0 %v13357
  %15163 = vmatpush1.bf16.msra.mxu0 %v13356
  %15164 = vmatprep.subr.bf16.mxu0 %v13364
  %15165 = vmatpush1.bf16.msra.mxu0 %v13363
  %15166 = vmatprep.subr.bf16.mxu0 %v13371
  %15167 = vmatpush1.bf16.msra.mxu0 %v13370
  %15168 = vmatprep.subr.bf16.mxu0 %v13378
  %15169 = vmatpush1.bf16.msra.mxu0 %v13377
  %15170 = vmatprep.subr.bf16.mxu0 %v13385
  %15171 = vmatpush1.bf16.msra.mxu0 %v13384
  %15172 = vmatprep.subr.bf16.mxu0 %v13392
  %15173 = vmatpush1.bf16.msra.mxu0 %v13391
  %15174 = vmatprep.mubr.bf16.mxu0 %v9748
  %15175 = vmatmul.mubr.bf16.gmra.mrb[0].mxu0 %v9747
  %v15176 = vpop.f32.mrb[0].mxu0
  %v15177 = vadd.f32 %v15136, %v15176
  %v15178 = vpop.f32.mrb[0].mxu0
  %v15179 = vadd.f32 %v15138, %v15178
  %v15180 = vpop.f32.mrb[0].mxu0
  %v15181 = vpop.f32.mrb[0].mxu0
  %15182 = vdwg.mxu0
  %15183 = vmatprep.subr.bf16.mxu0 %v13399
  %15184 = vmatpush1.bf16.msra.mxu0 %v13398
  %15185 = vmatprep.subr.bf16.mxu0 %v13406
  %15186 = vmatpush1.bf16.msra.mxu0 %v13405
  %15187 = vmatprep.subr.bf16.mxu0 %v13413
  %15188 = vmatpush1.bf16.msra.mxu0 %v13412
  %15189 = vmatprep.subr.bf16.mxu0 %v13420
  %15190 = vmatpush1.bf16.msra.mxu0 %v13419
  %15191 = vmatprep.subr.bf16.mxu0 %v13427
  %15192 = vmatpush1.bf16.msra.mxu0 %v13426
  %15193 = vmatprep.subr.bf16.mxu0 %v13434
  %15194 = vmatpush1.bf16.msra.mxu0 %v13433
  %15195 = vmatprep.subr.bf16.mxu0 %v13441
  %15196 = vmatpush1.bf16.msra.mxu0 %v13440
  %15197 = vmatprep.subr.bf16.mxu0 %v13448
  %15198 = vmatpush1.bf16.msra.mxu0 %v13447
  %15199 = vmatprep.subr.bf16.mxu0 %v13455
  %15200 = vmatpush1.bf16.msra.mxu0 %v13454
  %15201 = vmatprep.subr.bf16.mxu0 %v13462
  %15202 = vmatpush1.bf16.msra.mxu0 %v13461
  %15203 = vmatprep.subr.bf16.mxu0 %v13469
  %15204 = vmatpush1.bf16.msra.mxu0 %v13468
  %15205 = vmatprep.subr.bf16.mxu0 %v13476
  %15206 = vmatpush1.bf16.msra.mxu0 %v13475
  %15207 = vmatprep.subr.bf16.mxu0 %v13483
  %15208 = vmatpush1.bf16.msra.mxu0 %v13482
  %15209 = vmatprep.subr.bf16.mxu0 %v13490
  %15210 = vmatpush1.bf16.msra.mxu0 %v13489
  %15211 = vmatprep.subr.bf16.mxu0 %v13497
  %15212 = vmatpush1.bf16.msra.mxu0 %v13496
  %15213 = vmatprep.subr.bf16.mxu0 %v13504
  %15214 = vmatpush1.bf16.msra.mxu0 %v13503
  %15215 = vmatprep.mubr.bf16.mxu0 %v9750
  %15216 = vmatmul.mubr.bf16.gmra.mrb[0].mxu0 %v9749
  %v15217 = vpop.f32.mrb[0].mxu0
  %v15218 = vadd.f32 %v15177, %v15217
  %v15219 = vpop.f32.mrb[0].mxu0
  %v15220 = vadd.f32 %v15179, %v15219
  %v15221 = vpop.f32.mrb[0].mxu0
  %v15222 = vpop.f32.mrb[0].mxu0
  %15223 = vdwg.mxu0
  %15224 = vmatprep.subr.bf16.mxu0 %v13511
  %15225 = vmatpush1.bf16.msra.mxu0 %v13510
  %15226 = vmatprep.subr.bf16.mxu0 %v13518
  %15227 = vmatpush1.bf16.msra.mxu0 %v13517
  %15228 = vmatprep.subr.bf16.mxu0 %v13525
  %15229 = vmatpush1.bf16.msra.mxu0 %v13524
  %15230 = vmatprep.subr.bf16.mxu0 %v13532
  %15231 = vmatpush1.bf16.msra.mxu0 %v13531
  %15232 = vmatprep.subr.bf16.mxu0 %v13539
  %15233 = vmatpush1.bf16.msra.mxu0 %v13538
  %15234 = vmatprep.subr.bf16.mxu0 %v13546
  %15235 = vmatpush1.bf16.msra.mxu0 %v13545
  %15236 = vmatprep.subr.bf16.mxu0 %v13553
  %15237 = vmatpush1.bf16.msra.mxu0 %v13552
  %15238 = vmatprep.subr.bf16.mxu0 %v13560
  %15239 = vmatpush1.bf16.msra.mxu0 %v13559
  %15240 = vmatprep.subr.bf16.mxu0 %v13567
  %15241 = vmatpush1.bf16.msra.mxu0 %v13566
  %15242 = vmatprep.subr.bf16.mxu0 %v13574
  %15243 = vmatpush1.bf16.msra.mxu0 %v13573
  %15244 = vmatprep.subr.bf16.mxu0 %v13581
  %15245 = vmatpush1.bf16.msra.mxu0 %v13580
  %15246 = vmatprep.subr.bf16.mxu0 %v13588
  %15247 = vmatpush1.bf16.msra.mxu0 %v13587
  %15248 = vmatprep.subr.bf16.mxu0 %v13595
  %15249 = vmatpush1.bf16.msra.mxu0 %v13594
  %15250 = vmatprep.subr.bf16.mxu0 %v13602
  %15251 = vmatpush1.bf16.msra.mxu0 %v13601
  %15252 = vmatprep.subr.bf16.mxu0 %v13609
  %15253 = vmatpush1.bf16.msra.mxu0 %v13608
  %15254 = vmatprep.subr.bf16.mxu0 %v13616
  %15255 = vmatpush1.bf16.msra.mxu0 %v13615
  %15256 = vmatprep.mubr.bf16.mxu0 %v9752
  %15257 = vmatmul.mubr.bf16.gmra.mrb[0].mxu0 %v9751
  %v15258 = vpop.f32.mrb[0].mxu0
  %v15259 = vadd.f32 %v15218, %v15258
  %v15260 = vpop.f32.mrb[0].mxu0
  %v15261 = vadd.f32 %v15220, %v15260
  %v15262 = vpop.f32.mrb[0].mxu0
  %v15263 = vpop.f32.mrb[0].mxu0
  %15264 = vdwg.mxu0
  %15265 = vmatprep.subr.bf16.mxu0 %v13623
  %15266 = vmatpush1.bf16.msra.mxu0 %v13622
  %15267 = vmatprep.subr.bf16.mxu0 %v13630
  %15268 = vmatpush1.bf16.msra.mxu0 %v13629
  %15269 = vmatprep.subr.bf16.mxu0 %v13637
  %15270 = vmatpush1.bf16.msra.mxu0 %v13636
  %15271 = vmatprep.subr.bf16.mxu0 %v13644
  %15272 = vmatpush1.bf16.msra.mxu0 %v13643
  %15273 = vmatprep.subr.bf16.mxu0 %v13651
  %15274 = vmatpush1.bf16.msra.mxu0 %v13650
  %15275 = vmatprep.subr.bf16.mxu0 %v13658
  %15276 = vmatpush1.bf16.msra.mxu0 %v13657
  %15277 = vmatprep.subr.bf16.mxu0 %v13665
  %15278 = vmatpush1.bf16.msra.mxu0 %v13664
  %15279 = vmatprep.subr.bf16.mxu0 %v13672
  %15280 = vmatpush1.bf16.msra.mxu0 %v13671
  %15281 = vmatprep.subr.bf16.mxu0 %v13679
  %15282 = vmatpush1.bf16.msra.mxu0 %v13678
  %15283 = vmatprep.subr.bf16.mxu0 %v13686
  %15284 = vmatpush1.bf16.msra.mxu0 %v13685
  %15285 = vmatprep.subr.bf16.mxu0 %v13693
  %15286 = vmatpush1.bf16.msra.mxu0 %v13692
  %15287 = vmatprep.subr.bf16.mxu0 %v13700
  %15288 = vmatpush1.bf16.msra.mxu0 %v13699
  %15289 = vmatprep.subr.bf16.mxu0 %v13707
  %15290 = vmatpush1.bf16.msra.mxu0 %v13706
  %15291 = vmatprep.subr.bf16.mxu0 %v13714
  %15292 = vmatpush1.bf16.msra.mxu0 %v13713
  %15293 = vmatprep.subr.bf16.mxu0 %v13721
  %15294 = vmatpush1.bf16.msra.mxu0 %v13720
  %15295 = vmatprep.subr.bf16.mxu0 %v13728
  %15296 = vmatpush1.bf16.msra.mxu0 %v13727
  %15297 = vmatprep.mubr.bf16.mxu0 %v9754
  %15298 = vmatmul.mubr.bf16.gmra.mrb[0].mxu0 %v9753
  %v15299 = vpop.f32.mrb[0].mxu0
  %v15300 = vadd.f32 %v15259, %v15299
  %v15301 = vpop.f32.mrb[0].mxu0
  %v15302 = vadd.f32 %v15261, %v15301
  %v15303 = vpop.f32.mrb[0].mxu0
  %v15304 = vpop.f32.mrb[0].mxu0
  %15305 = vdwg.mxu0
  %15306 = vmatprep.subr.bf16.mxu0 %v13735
  %15307 = vmatpush1.bf16.msra.mxu0 %v13734
  %15308 = vmatprep.subr.bf16.mxu0 %v13742
  %15309 = vmatpush1.bf16.msra.mxu0 %v13741
  %15310 = vmatprep.subr.bf16.mxu0 %v13749
  %15311 = vmatpush1.bf16.msra.mxu0 %v13748
  %15312 = vmatprep.subr.bf16.mxu0 %v13756
  %15313 = vmatpush1.bf16.msra.mxu0 %v13755
  %15314 = vmatprep.subr.bf16.mxu0 %v13763
  %15315 = vmatpush1.bf16.msra.mxu0 %v13762
  %15316 = vmatprep.subr.bf16.mxu0 %v13770
  %15317 = vmatpush1.bf16.msra.mxu0 %v13769
  %15318 = vmatprep.subr.bf16.mxu0 %v13777
  %15319 = vmatpush1.bf16.msra.mxu0 %v13776
  %15320 = vmatprep.subr.bf16.mxu0 %v13784
  %15321 = vmatpush1.bf16.msra.mxu0 %v13783
  %15322 = vmatprep.subr.bf16.mxu0 %v13791
  %15323 = vmatpush1.bf16.msra.mxu0 %v13790
  %15324 = vmatprep.subr.bf16.mxu0 %v13798
  %15325 = vmatpush1.bf16.msra.mxu0 %v13797
  %15326 = vmatprep.subr.bf16.mxu0 %v13805
  %15327 = vmatpush1.bf16.msra.mxu0 %v13804
  %15328 = vmatprep.subr.bf16.mxu0 %v13812
  %15329 = vmatpush1.bf16.msra.mxu0 %v13811
  %15330 = vmatprep.subr.bf16.mxu0 %v13819
  %15331 = vmatpush1.bf16.msra.mxu0 %v13818
  %15332 = vmatprep.subr.bf16.mxu0 %v13826
  %15333 = vmatpush1.bf16.msra.mxu0 %v13825
  %15334 = vmatprep.subr.bf16.mxu0 %v13833
  %15335 = vmatpush1.bf16.msra.mxu0 %v13832
  %15336 = vmatprep.subr.bf16.mxu0 %v13840
  %15337 = vmatpush1.bf16.msra.mxu0 %v13839
  %15338 = vmatprep.mubr.bf16.mxu0 %v9756
  %15339 = vmatmul.mubr.bf16.gmra.mrb[0].mxu0 %v9755
  %v15340 = vpop.f32.mrb[0].mxu0
  %v15341 = vadd.f32 %v15300, %v15340
  %v15342 = vpop.f32.mrb[0].mxu0
  %v15343 = vadd.f32 %v15302, %v15342
  %v15344 = vpop.f32.mrb[0].mxu0
  %v15345 = vpop.f32.mrb[0].mxu0
  %15346 = vdwg.mxu0
  %15347 = vmatprep.subr.bf16.mxu0 %v13847
  %15348 = vmatpush1.bf16.msra.mxu0 %v13846
  %15349 = vmatprep.subr.bf16.mxu0 %v13854
  %15350 = vmatpush1.bf16.msra.mxu0 %v13853
  %15351 = vmatprep.subr.bf16.mxu0 %v13861
  %15352 = vmatpush1.bf16.msra.mxu0 %v13860
  %15353 = vmatprep.subr.bf16.mxu0 %v13868
  %15354 = vmatpush1.bf16.msra.mxu0 %v13867
  %15355 = vmatprep.subr.bf16.mxu0 %v13875
  %15356 = vmatpush1.bf16.msra.mxu0 %v13874
  %15357 = vmatprep.subr.bf16.mxu0 %v13882
  %15358 = vmatpush1.bf16.msra.mxu0 %v13881
  %15359 = vmatprep.subr.bf16.mxu0 %v13889
  %15360 = vmatpush1.bf16.msra.mxu0 %v13888
  %15361 = vmatprep.subr.bf16.mxu0 %v13896
  %15362 = vmatpush1.bf16.msra.mxu0 %v13895
  %15363 = vmatprep.subr.bf16.mxu0 %v13903
  %15364 = vmatpush1.bf16.msra.mxu0 %v13902
  %15365 = vmatprep.subr.bf16.mxu0 %v13910
  %15366 = vmatpush1.bf16.msra.mxu0 %v13909
  %15367 = vmatprep.subr.bf16.mxu0 %v13917
  %15368 = vmatpush1.bf16.msra.mxu0 %v13916
  %15369 = vmatprep.subr.bf16.mxu0 %v13924
  %15370 = vmatpush1.bf16.msra.mxu0 %v13923
  %15371 = vmatprep.subr.bf16.mxu0 %v13931
  %15372 = vmatpush1.bf16.msra.mxu0 %v13930
  %15373 = vmatprep.subr.bf16.mxu0 %v13938
  %15374 = vmatpush1.bf16.msra.mxu0 %v13937
  %15375 = vmatprep.subr.bf16.mxu0 %v13945
  %15376 = vmatpush1.bf16.msra.mxu0 %v13944
  %15377 = vmatprep.subr.bf16.mxu0 %v13952
  %15378 = vmatpush1.bf16.msra.mxu0 %v13951
  %15379 = vmatprep.mubr.bf16.mxu0 %v9758
  %15380 = vmatmul.mubr.bf16.gmra.mrb[0].mxu0 %v9757
  %v15381 = vpop.f32.mrb[0].mxu0
  %v15382 = vadd.f32 %v15341, %v15381
  %v15383 = vpop.f32.mrb[0].mxu0
  %v15384 = vadd.f32 %v15343, %v15383
  %v15385 = vpop.f32.mrb[0].mxu0
  %v15386 = vpop.f32.mrb[0].mxu0
  %15387 = vdwg.mxu0
  %15388 = vmatprep.subr.bf16.mxu0 %v14762
  %15389 = vmatpush1.bf16.msra.mxu0 %v14759
  %15390 = vmatprep.subr.bf16.mxu0 0
  %15391 = vmatpush1.bf16.msra.mxu0 0
  %15392 = vmatprep.subr.bf16.mxu0 0
  %15393 = vmatpush1.bf16.msra.mxu0 0
  %15394 = vmatprep.subr.bf16.mxu0 0
  %15395 = vmatpush1.bf16.msra.mxu0 0
  %15396 = vmatprep.subr.bf16.mxu0 0
  %15397 = vmatpush1.bf16.msra.mxu0 0
  %15398 = vmatprep.subr.bf16.mxu0 0
  %15399 = vmatpush1.bf16.msra.mxu0 0
  %15400 = vmatprep.subr.bf16.mxu0 0
  %15401 = vmatpush1.bf16.msra.mxu0 0
  %15402 = vmatprep.subr.bf16.mxu0 0
  %15403 = vmatpush1.bf16.msra.mxu0 0
  %15404 = vmatprep.subr.bf16.mxu0 0
  %15405 = vmatpush1.bf16.msra.mxu0 0
  %15406 = vmatprep.subr.bf16.mxu0 0
  %15407 = vmatpush1.bf16.msra.mxu0 0
  %15408 = vmatprep.subr.bf16.mxu0 0
  %15409 = vmatpush1.bf16.msra.mxu0 0
  %15410 = vmatprep.subr.bf16.mxu0 0
  %15411 = vmatpush1.bf16.msra.mxu0 0
  %15412 = vmatprep.subr.bf16.mxu0 0
  %15413 = vmatpush1.bf16.msra.mxu0 0
  %15414 = vmatprep.subr.bf16.mxu0 0
  %15415 = vmatpush1.bf16.msra.mxu0 0
  %15416 = vmatprep.subr.bf16.mxu0 0
  %15417 = vmatpush1.bf16.msra.mxu0 0
  %15418 = vmatprep.subr.bf16.mxu0 0
  %15419 = vmatpush1.bf16.msra.mxu0 0
  %15420 = vmatprep.mubr.bf16.mxu0 0
  %15421 = vmatmul.mubr.bf16.gmra.mrb[0].mxu0 %v14749
  %v15422 = vpop.f32.mrb[0].mxu0
  %v15423 = vadd.f32 %v15382, %v15422
  %v15424 = vpop.f32.mrb[0].mxu0
  %v15425 = vadd.f32 %v15384, %v15424
  %v15426 = vpop.f32.mrb[0].mxu0
  %v15427 = vpop.f32.mrb[0].mxu0
  %15428 = vdwg.mxu0
  %15429 = vmatprep.subr.bf16.mxu0 %v13177
  %15430 = vmatpush1.bf16.msra.mxu0 %v13176
  %15431 = vmatprep.subr.bf16.mxu0 %v13184
  %15432 = vmatpush1.bf16.msra.mxu0 %v13183
  %15433 = vmatprep.subr.bf16.mxu0 %v13191
  %15434 = vmatpush1.bf16.msra.mxu0 %v13190
  %15435 = vmatprep.subr.bf16.mxu0 %v13198
  %15436 = vmatpush1.bf16.msra.mxu0 %v13197
  %15437 = vmatprep.subr.bf16.mxu0 %v13205
  %15438 = vmatpush1.bf16.msra.mxu0 %v13204
  %15439 = vmatprep.subr.bf16.mxu0 %v13212
  %15440 = vmatpush1.bf16.msra.mxu0 %v13211
  %15441 = vmatprep.subr.bf16.mxu0 %v13219
  %15442 = vmatpush1.bf16.msra.mxu0 %v13218
  %15443 = vmatprep.subr.bf16.mxu0 %v13226
  %15444 = vmatpush1.bf16.msra.mxu0 %v13225
  %15445 = vmatprep.subr.bf16.mxu0 %v13233
  %15446 = vmatpush1.bf16.msra.mxu0 %v13232
  %15447 = vmatprep.subr.bf16.mxu0 %v13240
  %15448 = vmatpush1.bf16.msra.mxu0 %v13239
  %15449 = vmatprep.subr.bf16.mxu0 %v13247
  %15450 = vmatpush1.bf16.msra.mxu0 %v13246
  %15451 = vmatprep.subr.bf16.mxu0 %v13254
  %15452 = vmatpush1.bf16.msra.mxu0 %v13253
  %15453 = vmatprep.subr.bf16.mxu0 %v13261
  %15454 = vmatpush1.bf16.msra.mxu0 %v13260
  %15455 = vmatprep.subr.bf16.mxu0 %v13268
  %15456 = vmatpush1.bf16.msra.mxu0 %v13267
  %15457 = vmatprep.subr.bf16.mxu0 %v13275
  %15458 = vmatpush1.bf16.msra.mxu0 %v13274
  %15459 = vmatprep.subr.bf16.mxu0 %v13282
  %15460 = vmatpush1.bf16.msra.mxu0 %v13281
  %15461 = vmatprep.mubr.bf16.mxu0 %v9746
  %15462 = vmatmul.mubr.bf16.gmra.mrb[0].mxu0 %v9745
  %v15463 = vpop.f32.mrb[0].mxu0
  %v15464 = vadd.f32 %v10681, %v15463
  %v15465 = vpop.f32.mrb[0].mxu0
  %v15466 = vadd.f32 %v10685, %v15465
  %v15467 = vpop.f32.mrb[0].mxu0
  %v15468 = vpop.f32.mrb[0].mxu0
  %15469 = vdwg.mxu0
  %15470 = vmatprep.subr.bf16.mxu0 %v13289
  %15471 = vmatpush1.bf16.msra.mxu0 %v13288
  %15472 = vmatprep.subr.bf16.mxu0 %v13296
  %15473 = vmatpush1.bf16.msra.mxu0 %v13295
  %15474 = vmatprep.subr.bf16.mxu0 %v13303
  %15475 = vmatpush1.bf16.msra.mxu0 %v13302
  %15476 = vmatprep.subr.bf16.mxu0 %v13310
  %15477 = vmatpush1.bf16.msra.mxu0 %v13309
  %15478 = vmatprep.subr.bf16.mxu0 %v13317
  %15479 = vmatpush1.bf16.msra.mxu0 %v13316
  %15480 = vmatprep.subr.bf16.mxu0 %v13324
  %15481 = vmatpush1.bf16.msra.mxu0 %v13323
  %15482 = vmatprep.subr.bf16.mxu0 %v13331
  %15483 = vmatpush1.bf16.msra.mxu0 %v13330
  %15484 = vmatprep.subr.bf16.mxu0 %v13338
  %15485 = vmatpush1.bf16.msra.mxu0 %v13337
  %15486 = vmatprep.subr.bf16.mxu0 %v13345
  %15487 = vmatpush1.bf16.msra.mxu0 %v13344
  %15488 = vmatprep.subr.bf16.mxu0 %v13352
  %15489 = vmatpush1.bf16.msra.mxu0 %v13351
  %15490 = vmatprep.subr.bf16.mxu0 %v13359
  %15491 = vmatpush1.bf16.msra.mxu0 %v13358
  %15492 = vmatprep.subr.bf16.mxu0 %v13366
  %15493 = vmatpush1.bf16.msra.mxu0 %v13365
  %15494 = vmatprep.subr.bf16.mxu0 %v13373
  %15495 = vmatpush1.bf16.msra.mxu0 %v13372
  %15496 = vmatprep.subr.bf16.mxu0 %v13380
  %15497 = vmatpush1.bf16.msra.mxu0 %v13379
  %15498 = vmatprep.subr.bf16.mxu0 %v13387
  %15499 = vmatpush1.bf16.msra.mxu0 %v13386
  %15500 = vmatprep.subr.bf16.mxu0 %v13394
  %15501 = vmatpush1.bf16.msra.mxu0 %v13393
  %15502 = vmatprep.mubr.bf16.mxu0 %v9748
  %15503 = vmatmul.mubr.bf16.gmra.mrb[0].mxu0 %v9747
  %v15504 = vpop.f32.mrb[0].mxu0
  %v15505 = vadd.f32 %v15464, %v15504
  %v15506 = vpop.f32.mrb[0].mxu0
  %v15507 = vadd.f32 %v15466, %v15506
  %v15508 = vpop.f32.mrb[0].mxu0
  %v15509 = vpop.f32.mrb[0].mxu0
  %15510 = vdwg.mxu0
  %15511 = vmatprep.subr.bf16.mxu0 %v13401
  %15512 = vmatpush1.bf16.msra.mxu0 %v13400
  %15513 = vmatprep.subr.bf16.mxu0 %v13408
  %15514 = vmatpush1.bf16.msra.mxu0 %v13407
  %15515 = vmatprep.subr.bf16.mxu0 %v13415
  %15516 = vmatpush1.bf16.msra.mxu0 %v13414
  %15517 = vmatprep.subr.bf16.mxu0 %v13422
  %15518 = vmatpush1.bf16.msra.mxu0 %v13421
  %15519 = vmatprep.subr.bf16.mxu0 %v13429
  %15520 = vmatpush1.bf16.msra.mxu0 %v13428
  %15521 = vmatprep.subr.bf16.mxu0 %v13436
  %15522 = vmatpush1.bf16.msra.mxu0 %v13435
  %15523 = vmatprep.subr.bf16.mxu0 %v13443
  %15524 = vmatpush1.bf16.msra.mxu0 %v13442
  %15525 = vmatprep.subr.bf16.mxu0 %v13450
  %15526 = vmatpush1.bf16.msra.mxu0 %v13449
  %15527 = vmatprep.subr.bf16.mxu0 %v13457
  %15528 = vmatpush1.bf16.msra.mxu0 %v13456
  %15529 = vmatprep.subr.bf16.mxu0 %v13464
  %15530 = vmatpush1.bf16.msra.mxu0 %v13463
  %15531 = vmatprep.subr.bf16.mxu0 %v13471
  %15532 = vmatpush1.bf16.msra.mxu0 %v13470
  %15533 = vmatprep.subr.bf16.mxu0 %v13478
  %15534 = vmatpush1.bf16.msra.mxu0 %v13477
  %15535 = vmatprep.subr.bf16.mxu0 %v13485
  %15536 = vmatpush1.bf16.msra.mxu0 %v13484
  %15537 = vmatprep.subr.bf16.mxu0 %v13492
  %15538 = vmatpush1.bf16.msra.mxu0 %v13491
  %15539 = vmatprep.subr.bf16.mxu0 %v13499
  %15540 = vmatpush1.bf16.msra.mxu0 %v13498
  %15541 = vmatprep.subr.bf16.mxu0 %v13506
  %15542 = vmatpush1.bf16.msra.mxu0 %v13505
  %15543 = vmatprep.mubr.bf16.mxu0 %v9750
  %15544 = vmatmul.mubr.bf16.gmra.mrb[0].mxu0 %v9749
  %v15545 = vpop.f32.mrb[0].mxu0
  %v15546 = vadd.f32 %v15505, %v15545
  %v15547 = vpop.f32.mrb[0].mxu0
  %v15548 = vadd.f32 %v15507, %v15547
  %v15549 = vpop.f32.mrb[0].mxu0
  %v15550 = vpop.f32.mrb[0].mxu0
  %15551 = vdwg.mxu0
  %15552 = vmatprep.subr.bf16.mxu0 %v13513
  %15553 = vmatpush1.bf16.msra.mxu0 %v13512
  %15554 = vmatprep.subr.bf16.mxu0 %v13520
  %15555 = vmatpush1.bf16.msra.mxu0 %v13519
  %15556 = vmatprep.subr.bf16.mxu0 %v13527
  %15557 = vmatpush1.bf16.msra.mxu0 %v13526
  %15558 = vmatprep.subr.bf16.mxu0 %v13534
  %15559 = vmatpush1.bf16.msra.mxu0 %v13533
  %15560 = vmatprep.subr.bf16.mxu0 %v13541
  %15561 = vmatpush1.bf16.msra.mxu0 %v13540
  %15562 = vmatprep.subr.bf16.mxu0 %v13548
  %15563 = vmatpush1.bf16.msra.mxu0 %v13547
  %15564 = vmatprep.subr.bf16.mxu0 %v13555
  %15565 = vmatpush1.bf16.msra.mxu0 %v13554
  %15566 = vmatprep.subr.bf16.mxu0 %v13562
  %15567 = vmatpush1.bf16.msra.mxu0 %v13561
  %15568 = vmatprep.subr.bf16.mxu0 %v13569
  %15569 = vmatpush1.bf16.msra.mxu0 %v13568
  %15570 = vmatprep.subr.bf16.mxu0 %v13576
  %15571 = vmatpush1.bf16.msra.mxu0 %v13575
  %15572 = vmatprep.subr.bf16.mxu0 %v13583
  %15573 = vmatpush1.bf16.msra.mxu0 %v13582
  %15574 = vmatprep.subr.bf16.mxu0 %v13590
  %15575 = vmatpush1.bf16.msra.mxu0 %v13589
  %15576 = vmatprep.subr.bf16.mxu0 %v13597
  %15577 = vmatpush1.bf16.msra.mxu0 %v13596
  %15578 = vmatprep.subr.bf16.mxu0 %v13604
  %15579 = vmatpush1.bf16.msra.mxu0 %v13603
  %15580 = vmatprep.subr.bf16.mxu0 %v13611
  %15581 = vmatpush1.bf16.msra.mxu0 %v13610
  %15582 = vmatprep.subr.bf16.mxu0 %v13618
  %15583 = vmatpush1.bf16.msra.mxu0 %v13617
  %15584 = vmatprep.mubr.bf16.mxu0 %v9752
  %15585 = vmatmul.mubr.bf16.gmra.mrb[0].mxu0 %v9751
  %v15586 = vpop.f32.mrb[0].mxu0
  %v15587 = vadd.f32 %v15546, %v15586
  %v15588 = vpop.f32.mrb[0].mxu0
  %v15589 = vadd.f32 %v15548, %v15588
  %v15590 = vpop.f32.mrb[0].mxu0
  %v15591 = vpop.f32.mrb[0].mxu0
  %15592 = vdwg.mxu0
  %15593 = vmatprep.subr.bf16.mxu0 %v13625
  %15594 = vmatpush1.bf16.msra.mxu0 %v13624
  %15595 = vmatprep.subr.bf16.mxu0 %v13632
  %15596 = vmatpush1.bf16.msra.mxu0 %v13631
  %15597 = vmatprep.subr.bf16.mxu0 %v13639
  %15598 = vmatpush1.bf16.msra.mxu0 %v13638
  %15599 = vmatprep.subr.bf16.mxu0 %v13646
  %15600 = vmatpush1.bf16.msra.mxu0 %v13645
  %15601 = vmatprep.subr.bf16.mxu0 %v13653
  %15602 = vmatpush1.bf16.msra.mxu0 %v13652
  %15603 = vmatprep.subr.bf16.mxu0 %v13660
  %15604 = vmatpush1.bf16.msra.mxu0 %v13659
  %15605 = vmatprep.subr.bf16.mxu0 %v13667
  %15606 = vmatpush1.bf16.msra.mxu0 %v13666
  %15607 = vmatprep.subr.bf16.mxu0 %v13674
  %15608 = vmatpush1.bf16.msra.mxu0 %v13673
  %15609 = vmatprep.subr.bf16.mxu0 %v13681
  %15610 = vmatpush1.bf16.msra.mxu0 %v13680
  %15611 = vmatprep.subr.bf16.mxu0 %v13688
  %15612 = vmatpush1.bf16.msra.mxu0 %v13687
  %15613 = vmatprep.subr.bf16.mxu0 %v13695
  %15614 = vmatpush1.bf16.msra.mxu0 %v13694
  %15615 = vmatprep.subr.bf16.mxu0 %v13702
  %15616 = vmatpush1.bf16.msra.mxu0 %v13701
  %15617 = vmatprep.subr.bf16.mxu0 %v13709
  %15618 = vmatpush1.bf16.msra.mxu0 %v13708
  %15619 = vmatprep.subr.bf16.mxu0 %v13716
  %15620 = vmatpush1.bf16.msra.mxu0 %v13715
  %15621 = vmatprep.subr.bf16.mxu0 %v13723
  %15622 = vmatpush1.bf16.msra.mxu0 %v13722
  %15623 = vmatprep.subr.bf16.mxu0 %v13730
  %15624 = vmatpush1.bf16.msra.mxu0 %v13729
  %15625 = vmatprep.mubr.bf16.mxu0 %v9754
  %15626 = vmatmul.mubr.bf16.gmra.mrb[0].mxu0 %v9753
  %v15627 = vpop.f32.mrb[0].mxu0
  %v15628 = vadd.f32 %v15587, %v15627
  %v15629 = vpop.f32.mrb[0].mxu0
  %v15630 = vadd.f32 %v15589, %v15629
  %v15631 = vpop.f32.mrb[0].mxu0
  %v15632 = vpop.f32.mrb[0].mxu0
  %15633 = vdwg.mxu0
  %15634 = vmatprep.subr.bf16.mxu0 %v13737
  %15635 = vmatpush1.bf16.msra.mxu0 %v13736
  %15636 = vmatprep.subr.bf16.mxu0 %v13744
  %15637 = vmatpush1.bf16.msra.mxu0 %v13743
  %15638 = vmatprep.subr.bf16.mxu0 %v13751
  %15639 = vmatpush1.bf16.msra.mxu0 %v13750
  %15640 = vmatprep.subr.bf16.mxu0 %v13758
  %15641 = vmatpush1.bf16.msra.mxu0 %v13757
  %15642 = vmatprep.subr.bf16.mxu0 %v13765
  %15643 = vmatpush1.bf16.msra.mxu0 %v13764
  %15644 = vmatprep.subr.bf16.mxu0 %v13772
  %15645 = vmatpush1.bf16.msra.mxu0 %v13771
  %15646 = vmatprep.subr.bf16.mxu0 %v13779
  %15647 = vmatpush1.bf16.msra.mxu0 %v13778
  %15648 = vmatprep.subr.bf16.mxu0 %v13786
  %15649 = vmatpush1.bf16.msra.mxu0 %v13785
  %15650 = vmatprep.subr.bf16.mxu0 %v13793
  %15651 = vmatpush1.bf16.msra.mxu0 %v13792
  %15652 = vmatprep.subr.bf16.mxu0 %v13800
  %15653 = vmatpush1.bf16.msra.mxu0 %v13799
  %15654 = vmatprep.subr.bf16.mxu0 %v13807
  %15655 = vmatpush1.bf16.msra.mxu0 %v13806
  %15656 = vmatprep.subr.bf16.mxu0 %v13814
  %15657 = vmatpush1.bf16.msra.mxu0 %v13813
  %15658 = vmatprep.subr.bf16.mxu0 %v13821
  %15659 = vmatpush1.bf16.msra.mxu0 %v13820
  %15660 = vmatprep.subr.bf16.mxu0 %v13828
  %15661 = vmatpush1.bf16.msra.mxu0 %v13827
  %15662 = vmatprep.subr.bf16.mxu0 %v13835
  %15663 = vmatpush1.bf16.msra.mxu0 %v13834
  %15664 = vmatprep.subr.bf16.mxu0 %v13842
  %15665 = vmatpush1.bf16.msra.mxu0 %v13841
  %15666 = vmatprep.mubr.bf16.mxu0 %v9756
  %15667 = vmatmul.mubr.bf16.gmra.mrb[0].mxu0 %v9755
  %v15668 = vpop.f32.mrb[0].mxu0
  %v15669 = vadd.f32 %v15628, %v15668
  %v15670 = vpop.f32.mrb[0].mxu0
  %v15671 = vadd.f32 %v15630, %v15670
  %v15672 = vpop.f32.mrb[0].mxu0
  %v15673 = vpop.f32.mrb[0].mxu0
  %15674 = vdwg.mxu0
  %15675 = vmatprep.subr.bf16.mxu0 %v13849
  %15676 = vmatpush1.bf16.msra.mxu0 %v13848
  %15677 = vmatprep.subr.bf16.mxu0 %v13856
  %15678 = vmatpush1.bf16.msra.mxu0 %v13855
  %15679 = vmatprep.subr.bf16.mxu0 %v13863
  %15680 = vmatpush1.bf16.msra.mxu0 %v13862
  %15681 = vmatprep.subr.bf16.mxu0 %v13870
  %15682 = vmatpush1.bf16.msra.mxu0 %v13869
  %15683 = vmatprep.subr.bf16.mxu0 %v13877
  %15684 = vmatpush1.bf16.msra.mxu0 %v13876
  %15685 = vmatprep.subr.bf16.mxu0 %v13884
  %15686 = vmatpush1.bf16.msra.mxu0 %v13883
  %15687 = vmatprep.subr.bf16.mxu0 %v13891
  %15688 = vmatpush1.bf16.msra.mxu0 %v13890
  %15689 = vmatprep.subr.bf16.mxu0 %v13898
  %15690 = vmatpush1.bf16.msra.mxu0 %v13897
  %15691 = vmatprep.subr.bf16.mxu0 %v13905
  %15692 = vmatpush1.bf16.msra.mxu0 %v13904
  %15693 = vmatprep.subr.bf16.mxu0 %v13912
  %15694 = vmatpush1.bf16.msra.mxu0 %v13911
  %15695 = vmatprep.subr.bf16.mxu0 %v13919
  %15696 = vmatpush1.bf16.msra.mxu0 %v13918
  %15697 = vmatprep.subr.bf16.mxu0 %v13926
  %15698 = vmatpush1.bf16.msra.mxu0 %v13925
  %15699 = vmatprep.subr.bf16.mxu0 %v13933
  %15700 = vmatpush1.bf16.msra.mxu0 %v13932
  %15701 = vmatprep.subr.bf16.mxu0 %v13940
  %15702 = vmatpush1.bf16.msra.mxu0 %v13939
  %15703 = vmatprep.subr.bf16.mxu0 %v13947
  %15704 = vmatpush1.bf16.msra.mxu0 %v13946
  %15705 = vmatprep.subr.bf16.mxu0 %v13954
  %15706 = vmatpush1.bf16.msra.mxu0 %v13953
  %15707 = vmatprep.mubr.bf16.mxu0 %v9758
  %15708 = vmatmul.mubr.bf16.gmra.mrb[0].mxu0 %v9757
  %v15709 = vpop.f32.mrb[0].mxu0
  %v15710 = vadd.f32 %v15669, %v15709
  %v15711 = vpop.f32.mrb[0].mxu0
  %v15712 = vadd.f32 %v15671, %v15711
  %v15713 = vpop.f32.mrb[0].mxu0
  %v15714 = vpop.f32.mrb[0].mxu0
  %15715 = vdwg.mxu0
  %15716 = vmatprep.subr.bf16.mxu0 %v14768
  %15717 = vmatpush1.bf16.msra.mxu0 %v14765
  %15718 = vmatprep.subr.bf16.mxu0 0
  %15719 = vmatpush1.bf16.msra.mxu0 0
  %15720 = vmatprep.subr.bf16.mxu0 0
  %15721 = vmatpush1.bf16.msra.mxu0 0
  %15722 = vmatprep.subr.bf16.mxu0 0
  %15723 = vmatpush1.bf16.msra.mxu0 0
  %15724 = vmatprep.subr.bf16.mxu0 0
  %15725 = vmatpush1.bf16.msra.mxu0 0
  %15726 = vmatprep.subr.bf16.mxu0 0
  %15727 = vmatpush1.bf16.msra.mxu0 0
  %15728 = vmatprep.subr.bf16.mxu0 0
  %15729 = vmatpush1.bf16.msra.mxu0 0
  %15730 = vmatprep.subr.bf16.mxu0 0
  %15731 = vmatpush1.bf16.msra.mxu0 0
  %15732 = vmatprep.subr.bf16.mxu0 0
  %15733 = vmatpush1.bf16.msra.mxu0 0
  %15734 = vmatprep.subr.bf16.mxu0 0
  %15735 = vmatpush1.bf16.msra.mxu0 0
  %15736 = vmatprep.subr.bf16.mxu0 0
  %15737 = vmatpush1.bf16.msra.mxu0 0
  %15738 = vmatprep.subr.bf16.mxu0 0
  %15739 = vmatpush1.bf16.msra.mxu0 0
  %15740 = vmatprep.subr.bf16.mxu0 0
  %15741 = vmatpush1.bf16.msra.mxu0 0
  %15742 = vmatprep.subr.bf16.mxu0 0
  %15743 = vmatpush1.bf16.msra.mxu0 0
  %15744 = vmatprep.subr.bf16.mxu0 0
  %15745 = vmatpush1.bf16.msra.mxu0 0
  %15746 = vmatprep.subr.bf16.mxu0 0
  %15747 = vmatpush1.bf16.msra.mxu0 0
  %15748 = vmatprep.mubr.bf16.mxu0 0
  %15749 = vmatmul.mubr.bf16.gmra.mrb[0].mxu0 %v14749
  %v15750 = vpop.f32.mrb[0].mxu0
  %v15751 = vadd.f32 %v15710, %v15750
  %v15752 = vpop.f32.mrb[0].mxu0
  %v15753 = vadd.f32 %v15712, %v15752
  %v15754 = vpop.f32.mrb[0].mxu0
  %v15755 = vpop.f32.mrb[0].mxu0
  %15756 = vdwg.mxu0
  %15757 = vmatprep.subr.bf16.mxu0 0
  %15758 = vmatpush1.bf16.msra.mxu0 %v13178
  %15759 = vmatprep.subr.bf16.mxu0 0
  %15760 = vmatpush1.bf16.msra.mxu0 %v13185
  %15761 = vmatprep.subr.bf16.mxu0 0
  %15762 = vmatpush1.bf16.msra.mxu0 %v13192
  %15763 = vmatprep.subr.bf16.mxu0 0
  %15764 = vmatpush1.bf16.msra.mxu0 %v13199
  %15765 = vmatprep.subr.bf16.mxu0 0
  %15766 = vmatpush1.bf16.msra.mxu0 %v13206
  %15767 = vmatprep.subr.bf16.mxu0 0
  %15768 = vmatpush1.bf16.msra.mxu0 %v13213
  %15769 = vmatprep.subr.bf16.mxu0 0
  %15770 = vmatpush1.bf16.msra.mxu0 %v13220
  %15771 = vmatprep.subr.bf16.mxu0 0
  %15772 = vmatpush1.bf16.msra.mxu0 %v13227
  %15773 = vmatprep.subr.bf16.mxu0 0
  %15774 = vmatpush1.bf16.msra.mxu0 %v13234
  %15775 = vmatprep.subr.bf16.mxu0 0
  %15776 = vmatpush1.bf16.msra.mxu0 %v13241
  %15777 = vmatprep.subr.bf16.mxu0 0
  %15778 = vmatpush1.bf16.msra.mxu0 %v13248
  %15779 = vmatprep.subr.bf16.mxu0 0
  %15780 = vmatpush1.bf16.msra.mxu0 %v13255
  %15781 = vmatprep.subr.bf16.mxu0 0
  %15782 = vmatpush1.bf16.msra.mxu0 %v13262
  %15783 = vmatprep.subr.bf16.mxu0 0
  %15784 = vmatpush1.bf16.msra.mxu0 %v13269
  %15785 = vmatprep.subr.bf16.mxu0 0
  %15786 = vmatpush1.bf16.msra.mxu0 %v13276
  %15787 = vmatprep.subr.bf16.mxu0 0
  %15788 = vmatpush1.bf16.msra.mxu0 %v13283
  %15789 = vmatprep.mubr.bf16.mxu0 %v9746
  %15790 = vmatmul.mubr.bf16.gmra.mrb[0].mxu0 %v9745
  %v15791 = vpop.f32.mrb[0].mxu0
  %v15792 = vadd.f32 %v10689, %v15791
  %v15793 = vpop.f32.mrb[0].mxu0
  %v15794 = vpop.f32.mrb[0].mxu0
  %v15795 = vpop.f32.mrb[0].mxu0
  %15796 = vdwg.mxu0
  %15797 = vmatprep.subr.bf16.mxu0 0
  %15798 = vmatpush1.bf16.msra.mxu0 %v13290
  %15799 = vmatprep.subr.bf16.mxu0 0
  %15800 = vmatpush1.bf16.msra.mxu0 %v13297
  %15801 = vmatprep.subr.bf16.mxu0 0
  %15802 = vmatpush1.bf16.msra.mxu0 %v13304
  %15803 = vmatprep.subr.bf16.mxu0 0
  %15804 = vmatpush1.bf16.msra.mxu0 %v13311
  %15805 = vmatprep.subr.bf16.mxu0 0
  %15806 = vmatpush1.bf16.msra.mxu0 %v13318
  %15807 = vmatprep.subr.bf16.mxu0 0
  %15808 = vmatpush1.bf16.msra.mxu0 %v13325
  %15809 = vmatprep.subr.bf16.mxu0 0
  %15810 = vmatpush1.bf16.msra.mxu0 %v13332
  %15811 = vmatprep.subr.bf16.mxu0 0
  %15812 = vmatpush1.bf16.msra.mxu0 %v13339
  %15813 = vmatprep.subr.bf16.mxu0 0
  %15814 = vmatpush1.bf16.msra.mxu0 %v13346
  %15815 = vmatprep.subr.bf16.mxu0 0
  %15816 = vmatpush1.bf16.msra.mxu0 %v13353
  %15817 = vmatprep.subr.bf16.mxu0 0
  %15818 = vmatpush1.bf16.msra.mxu0 %v13360
  %15819 = vmatprep.subr.bf16.mxu0 0
  %15820 = vmatpush1.bf16.msra.mxu0 %v13367
  %15821 = vmatprep.subr.bf16.mxu0 0
  %15822 = vmatpush1.bf16.msra.mxu0 %v13374
  %15823 = vmatprep.subr.bf16.mxu0 0
  %15824 = vmatpush1.bf16.msra.mxu0 %v13381
  %15825 = vmatprep.subr.bf16.mxu0 0
  %15826 = vmatpush1.bf16.msra.mxu0 %v13388
  %15827 = vmatprep.subr.bf16.mxu0 0
  %15828 = vmatpush1.bf16.msra.mxu0 %v13395
  %15829 = vmatprep.mubr.bf16.mxu0 %v9748
  %15830 = vmatmul.mubr.bf16.gmra.mrb[0].mxu0 %v9747
  %v15831 = vpop.f32.mrb[0].mxu0
  %v15832 = vadd.f32 %v15792, %v15831
  %v15833 = vpop.f32.mrb[0].mxu0
  %v15834 = vpop.f32.mrb[0].mxu0
  %v15835 = vpop.f32.mrb[0].mxu0
  %15836 = vdwg.mxu0
  %15837 = vmatprep.subr.bf16.mxu0 0
  %15838 = vmatpush1.bf16.msra.mxu0 %v13402
  %15839 = vmatprep.subr.bf16.mxu0 0
  %15840 = vmatpush1.bf16.msra.mxu0 %v13409
  %15841 = vmatprep.subr.bf16.mxu0 0
  %15842 = vmatpush1.bf16.msra.mxu0 %v13416
  %15843 = vmatprep.subr.bf16.mxu0 0
  %15844 = vmatpush1.bf16.msra.mxu0 %v13423
  %15845 = vmatprep.subr.bf16.mxu0 0
  %15846 = vmatpush1.bf16.msra.mxu0 %v13430
  %15847 = vmatprep.subr.bf16.mxu0 0
  %15848 = vmatpush1.bf16.msra.mxu0 %v13437
  %15849 = vmatprep.subr.bf16.mxu0 0
  %15850 = vmatpush1.bf16.msra.mxu0 %v13444
  %15851 = vmatprep.subr.bf16.mxu0 0
  %15852 = vmatpush1.bf16.msra.mxu0 %v13451
  %15853 = vmatprep.subr.bf16.mxu0 0
  %15854 = vmatpush1.bf16.msra.mxu0 %v13458
  %15855 = vmatprep.subr.bf16.mxu0 0
  %15856 = vmatpush1.bf16.msra.mxu0 %v13465
  %15857 = vmatprep.subr.bf16.mxu0 0
  %15858 = vmatpush1.bf16.msra.mxu0 %v13472
  %15859 = vmatprep.subr.bf16.mxu0 0
  %15860 = vmatpush1.bf16.msra.mxu0 %v13479
  %15861 = vmatprep.subr.bf16.mxu0 0
  %15862 = vmatpush1.bf16.msra.mxu0 %v13486
  %15863 = vmatprep.subr.bf16.mxu0 0
  %15864 = vmatpush1.bf16.msra.mxu0 %v13493
  %15865 = vmatprep.subr.bf16.mxu0 0
  %15866 = vmatpush1.bf16.msra.mxu0 %v13500
  %15867 = vmatprep.subr.bf16.mxu0 0
  %15868 = vmatpush1.bf16.msra.mxu0 %v13507
  %15869 = vmatprep.mubr.bf16.mxu0 %v9750
  %15870 = vmatmul.mubr.bf16.gmra.mrb[0].mxu0 %v9749
  %v15871 = vpop.f32.mrb[0].mxu0
  %v15872 = vadd.f32 %v15832, %v15871
  %v15873 = vpop.f32.mrb[0].mxu0
  %v15874 = vpop.f32.mrb[0].mxu0
  %v15875 = vpop.f32.mrb[0].mxu0
  %15876 = vdwg.mxu0
  %15877 = vmatprep.subr.bf16.mxu0 0
  %15878 = vmatpush1.bf16.msra.mxu0 %v13514
  %15879 = vmatprep.subr.bf16.mxu0 0
  %15880 = vmatpush1.bf16.msra.mxu0 %v13521
  %15881 = vmatprep.subr.bf16.mxu0 0
  %15882 = vmatpush1.bf16.msra.mxu0 %v13528
  %15883 = vmatprep.subr.bf16.mxu0 0
  %15884 = vmatpush1.bf16.msra.mxu0 %v13535
  %15885 = vmatprep.subr.bf16.mxu0 0
  %15886 = vmatpush1.bf16.msra.mxu0 %v13542
  %15887 = vmatprep.subr.bf16.mxu0 0
  %15888 = vmatpush1.bf16.msra.mxu0 %v13549
  %15889 = vmatprep.subr.bf16.mxu0 0
  %15890 = vmatpush1.bf16.msra.mxu0 %v13556
  %15891 = vmatprep.subr.bf16.mxu0 0
  %15892 = vmatpush1.bf16.msra.mxu0 %v13563
  %15893 = vmatprep.subr.bf16.mxu0 0
  %15894 = vmatpush1.bf16.msra.mxu0 %v13570
  %15895 = vmatprep.subr.bf16.mxu0 0
  %15896 = vmatpush1.bf16.msra.mxu0 %v13577
  %15897 = vmatprep.subr.bf16.mxu0 0
  %15898 = vmatpush1.bf16.msra.mxu0 %v13584
  %15899 = vmatprep.subr.bf16.mxu0 0
  %15900 = vmatpush1.bf16.msra.mxu0 %v13591
  %15901 = vmatprep.subr.bf16.mxu0 0
  %15902 = vmatpush1.bf16.msra.mxu0 %v13598
  %15903 = vmatprep.subr.bf16.mxu0 0
  %15904 = vmatpush1.bf16.msra.mxu0 %v13605
  %15905 = vmatprep.subr.bf16.mxu0 0
  %15906 = vmatpush1.bf16.msra.mxu0 %v13612
  %15907 = vmatprep.subr.bf16.mxu0 0
  %15908 = vmatpush1.bf16.msra.mxu0 %v13619
  %15909 = vmatprep.mubr.bf16.mxu0 %v9752
  %15910 = vmatmul.mubr.bf16.gmra.mrb[0].mxu0 %v9751
  %v15911 = vpop.f32.mrb[0].mxu0
  %v15912 = vadd.f32 %v15872, %v15911
  %v15913 = vpop.f32.mrb[0].mxu0
  %v15914 = vpop.f32.mrb[0].mxu0
  %v15915 = vpop.f32.mrb[0].mxu0
  %15916 = vdwg.mxu0
  %15917 = vmatprep.subr.bf16.mxu0 0
  %15918 = vmatpush1.bf16.msra.mxu0 %v13626
  %15919 = vmatprep.subr.bf16.mxu0 0
  %15920 = vmatpush1.bf16.msra.mxu0 %v13633
  %15921 = vmatprep.subr.bf16.mxu0 0
  %15922 = vmatpush1.bf16.msra.mxu0 %v13640
  %15923 = vmatprep.subr.bf16.mxu0 0
  %15924 = vmatpush1.bf16.msra.mxu0 %v13647
  %15925 = vmatprep.subr.bf16.mxu0 0
  %15926 = vmatpush1.bf16.msra.mxu0 %v13654
  %15927 = vmatprep.subr.bf16.mxu0 0
  %15928 = vmatpush1.bf16.msra.mxu0 %v13661
  %15929 = vmatprep.subr.bf16.mxu0 0
  %15930 = vmatpush1.bf16.msra.mxu0 %v13668
  %15931 = vmatprep.subr.bf16.mxu0 0
  %15932 = vmatpush1.bf16.msra.mxu0 %v13675
  %15933 = vmatprep.subr.bf16.mxu0 0
  %15934 = vmatpush1.bf16.msra.mxu0 %v13682
  %15935 = vmatprep.subr.bf16.mxu0 0
  %15936 = vmatpush1.bf16.msra.mxu0 %v13689
  %15937 = vmatprep.subr.bf16.mxu0 0
  %15938 = vmatpush1.bf16.msra.mxu0 %v13696
  %15939 = vmatprep.subr.bf16.mxu0 0
  %15940 = vmatpush1.bf16.msra.mxu0 %v13703
  %15941 = vmatprep.subr.bf16.mxu0 0
  %15942 = vmatpush1.bf16.msra.mxu0 %v13710
  %15943 = vmatprep.subr.bf16.mxu0 0
  %15944 = vmatpush1.bf16.msra.mxu0 %v13717
  %15945 = vmatprep.subr.bf16.mxu0 0
  %15946 = vmatpush1.bf16.msra.mxu0 %v13724
  %15947 = vmatprep.subr.bf16.mxu0 0
  %15948 = vmatpush1.bf16.msra.mxu0 %v13731
  %15949 = vmatprep.mubr.bf16.mxu0 %v9754
  %15950 = vmatmul.mubr.bf16.gmra.mrb[0].mxu0 %v9753
  %v15951 = vpop.f32.mrb[0].mxu0
  %v15952 = vadd.f32 %v15912, %v15951
  %v15953 = vpop.f32.mrb[0].mxu0
  %v15954 = vpop.f32.mrb[0].mxu0
  %v15955 = vpop.f32.mrb[0].mxu0
  %15956 = vdwg.mxu0
  %15957 = vmatprep.subr.bf16.mxu0 0
  %15958 = vmatpush1.bf16.msra.mxu0 %v13738
  %15959 = vmatprep.subr.bf16.mxu0 0
  %15960 = vmatpush1.bf16.msra.mxu0 %v13745
  %15961 = vmatprep.subr.bf16.mxu0 0
  %15962 = vmatpush1.bf16.msra.mxu0 %v13752
  %15963 = vmatprep.subr.bf16.mxu0 0
  %15964 = vmatpush1.bf16.msra.mxu0 %v13759
  %15965 = vmatprep.subr.bf16.mxu0 0
  %15966 = vmatpush1.bf16.msra.mxu0 %v13766
  %15967 = vmatprep.subr.bf16.mxu0 0
  %15968 = vmatpush1.bf16.msra.mxu0 %v13773
  %15969 = vmatprep.subr.bf16.mxu0 0
  %15970 = vmatpush1.bf16.msra.mxu0 %v13780
  %15971 = vmatprep.subr.bf16.mxu0 0
  %15972 = vmatpush1.bf16.msra.mxu0 %v13787
  %15973 = vmatprep.subr.bf16.mxu0 0
  %15974 = vmatpush1.bf16.msra.mxu0 %v13794
  %15975 = vmatprep.subr.bf16.mxu0 0
  %15976 = vmatpush1.bf16.msra.mxu0 %v13801
  %15977 = vmatprep.subr.bf16.mxu0 0
  %15978 = vmatpush1.bf16.msra.mxu0 %v13808
  %15979 = vmatprep.subr.bf16.mxu0 0
  %15980 = vmatpush1.bf16.msra.mxu0 %v13815
  %15981 = vmatprep.subr.bf16.mxu0 0
  %15982 = vmatpush1.bf16.msra.mxu0 %v13822
  %15983 = vmatprep.subr.bf16.mxu0 0
  %15984 = vmatpush1.bf16.msra.mxu0 %v13829
  %15985 = vmatprep.subr.bf16.mxu0 0
  %15986 = vmatpush1.bf16.msra.mxu0 %v13836
  %15987 = vmatprep.subr.bf16.mxu0 0
  %15988 = vmatpush1.bf16.msra.mxu0 %v13843
  %15989 = vmatprep.mubr.bf16.mxu0 %v9756
  %15990 = vmatmul.mubr.bf16.gmra.mrb[0].mxu0 %v9755
  %v15991 = vpop.f32.mrb[0].mxu0
  %v15992 = vadd.f32 %v15952, %v15991
  %v15993 = vpop.f32.mrb[0].mxu0
  %v15994 = vpop.f32.mrb[0].mxu0
  %v15995 = vpop.f32.mrb[0].mxu0
  %15996 = vdwg.mxu0
  %15997 = vmatprep.subr.bf16.mxu0 0
  %15998 = vmatpush1.bf16.msra.mxu0 %v13850
  %15999 = vmatprep.subr.bf16.mxu0 0
  %16000 = vmatpush1.bf16.msra.mxu0 %v13857
  %16001 = vmatprep.subr.bf16.mxu0 0
  %16002 = vmatpush1.bf16.msra.mxu0 %v13864
  %16003 = vmatprep.subr.bf16.mxu0 0
  %16004 = vmatpush1.bf16.msra.mxu0 %v13871
  %16005 = vmatprep.subr.bf16.mxu0 0
  %16006 = vmatpush1.bf16.msra.mxu0 %v13878
  %16007 = vmatprep.subr.bf16.mxu0 0
  %16008 = vmatpush1.bf16.msra.mxu0 %v13885
  %16009 = vmatprep.subr.bf16.mxu0 0
  %16010 = vmatpush1.bf16.msra.mxu0 %v13892
  %16011 = vmatprep.subr.bf16.mxu0 0
  %16012 = vmatpush1.bf16.msra.mxu0 %v13899
  %16013 = vmatprep.subr.bf16.mxu0 0
  %16014 = vmatpush1.bf16.msra.mxu0 %v13906
  %16015 = vmatprep.subr.bf16.mxu0 0
  %16016 = vmatpush1.bf16.msra.mxu0 %v13913
  %16017 = vmatprep.subr.bf16.mxu0 0
  %16018 = vmatpush1.bf16.msra.mxu0 %v13920
  %16019 = vmatprep.subr.bf16.mxu0 0
  %16020 = vmatpush1.bf16.msra.mxu0 %v13927
  %16021 = vmatprep.subr.bf16.mxu0 0
  %16022 = vmatpush1.bf16.msra.mxu0 %v13934
  %16023 = vmatprep.subr.bf16.mxu0 0
  %16024 = vmatpush1.bf16.msra.mxu0 %v13941
  %16025 = vmatprep.subr.bf16.mxu0 0
  %16026 = vmatpush1.bf16.msra.mxu0 %v13948
  %16027 = vmatprep.subr.bf16.mxu0 0
  %16028 = vmatpush1.bf16.msra.mxu0 %v13955
  %16029 = vmatprep.mubr.bf16.mxu0 %v9758
  %16030 = vmatmul.mubr.bf16.gmra.mrb[0].mxu0 %v9757
  %v16031 = vpop.f32.mrb[0].mxu0
  %v16032 = vadd.f32 %v15992, %v16031
  %v16033 = vpop.f32.mrb[0].mxu0
  %v16034 = vpop.f32.mrb[0].mxu0
  %v16035 = vpop.f32.mrb[0].mxu0
  %16036 = vdwg.mxu0
  %16037 = vmatprep.subr.bf16.mxu0 0
  %16038 = vmatpush1.bf16.msra.mxu0 %v14771
  %16039 = vmatprep.subr.bf16.mxu0 0
  %16040 = vmatpush1.bf16.msra.mxu0 0
  %16041 = vmatprep.subr.bf16.mxu0 0
  %16042 = vmatpush1.bf16.msra.mxu0 0
  %16043 = vmatprep.subr.bf16.mxu0 0
  %16044 = vmatpush1.bf16.msra.mxu0 0
  %16045 = vmatprep.subr.bf16.mxu0 0
  %16046 = vmatpush1.bf16.msra.mxu0 0
  %16047 = vmatprep.subr.bf16.mxu0 0
  %16048 = vmatpush1.bf16.msra.mxu0 0
  %16049 = vmatprep.subr.bf16.mxu0 0
  %16050 = vmatpush1.bf16.msra.mxu0 0
  %16051 = vmatprep.subr.bf16.mxu0 0
  %16052 = vmatpush1.bf16.msra.mxu0 0
  %16053 = vmatprep.subr.bf16.mxu0 0
  %16054 = vmatpush1.bf16.msra.mxu0 0
  %16055 = vmatprep.subr.bf16.mxu0 0
  %16056 = vmatpush1.bf16.msra.mxu0 0
  %16057 = vmatprep.subr.bf16.mxu0 0
  %16058 = vmatpush1.bf16.msra.mxu0 0
  %16059 = vmatprep.subr.bf16.mxu0 0
  %16060 = vmatpush1.bf16.msra.mxu0 0
  %16061 = vmatprep.subr.bf16.mxu0 0
  %16062 = vmatpush1.bf16.msra.mxu0 0
  %16063 = vmatprep.subr.bf16.mxu0 0
  %16064 = vmatpush1.bf16.msra.mxu0 0
  %16065 = vmatprep.subr.bf16.mxu0 0
  %16066 = vmatpush1.bf16.msra.mxu0 0
  %16067 = vmatprep.subr.bf16.mxu0 0
  %16068 = vmatpush1.bf16.msra.mxu0 0
  %16069 = vmatprep.mubr.bf16.mxu0 0
  %16070 = vmatmul.mubr.bf16.gmra.mrb[0].mxu0 %v14749
  %v16071 = vpop.f32.mrb[0].mxu0
  %v16072 = vadd.f32 %v16032, %v16071
  %v16073 = vpop.f32.mrb[0].mxu0
  %v16074 = vpop.f32.mrb[0].mxu0
  %v16075 = vpop.f32.mrb[0].mxu0
  %16076 = vdwg.mxu0
  %v16077 = vtanh.pop %v15095
  %v16078 = vtanh.pop %v15097
  %v16079 = vtanh.pop %v15423
  %v16080 = vtanh.pop %v15425
  %v16081 = vtanh.pop %v15751
  %v16082 = vtanh.pop %v15753
  %v16083 = vtanh.pop %v16072
  %16084 = vst [vmem:[%s17] sm:$0xff] %v16077
  %16085 = vst [vmem:[%s17 + $0x8] sm:$0xff] %v16078
  %16086 = vst [vmem:[%s17 + $0x10] sm:$0xff] %v16079
  %16087 = vst [vmem:[%s17 + $0x18] sm:$0xff] %v16080
  %16088 = vst [vmem:[%s17 + $0x20] sm:$0xff] %v16081
  %16089 = vst [vmem:[%s17 + $0x28] sm:$0xff] %v16082
  %16090 = vst.msk [vmem:[%s17 + $0x30] sm:$0xff] %vm1260, %v16083
  // Predicated region
  $region66: #{forward.1} parent=0 // pred_check
    _
  $region67: #{forward.1} parent=0 // pred_check_branch
    %16092 = sbr.rel (0) target = $region69
  $region68: #{forward.1} parent=0 // pred_region
    _
  $region69: #{forward.1} parent=0 // pred_fallthru
    _
  // Predicated region
  $region70: #{forward.1} parent=0 // pred_check
    _
  $region71: #{forward.1} parent=0 // pred_check_branch
    %16094 = sbr.rel (0) target = $region73
  $region72: #{forward.1} parent=0 // pred_region
    _
  $region73: #{forward.1} parent=0 // pred_fallthru
    _
  // Predicated region
  $region74: #{forward.1} parent=0 // pred_check
    _
  $region75: #{forward.1} parent=0 // pred_check_branch
    %16096 = sbr.rel (0) target = $region77
  $region76: #{forward.1} parent=0 // pred_region
    _
  $region77: #{forward.1} parent=0 // pred_fallthru
    _
  // Predicated region
  $region78: #{forward.1} parent=0 // pred_check
    _
  $region79: #{forward.1} parent=0 // pred_check_branch
    %16098 = sbr.rel (0) target = $region81
  $region80: #{forward.1} parent=0 // pred_region
    _
  $region81: #{forward.1} parent=0 // pred_fallthru
    _

</llo_original>
